<compile_context>
chip_gen: v7x
topology: tpu7x:2x2x1
jax: 0.10.0
libtpu: 0.0.40
codegen_flags: <defaults>
</compile_context>

<pallas_src>
import jax
import jax.numpy as jnp
from jax.experimental import pallas as pl
from jax.experimental.pallas import tpu as pltpu


# ----------------------------- static geometry ----------------------------- #
C1_IN, C1_OUT, K1 = 3, 6, 5          # conv1: 3 -> 6, 5x5, valid
C2_IN, C2_OUT, K2 = 6, 16, 5         # conv2: 6 -> 16, 5x5, valid
H1 = 28                              # conv1 output spatial (32-5+1)
P1 = 14                              # pool1 output spatial
H2 = 10                              # conv2 output spatial (14-5+1)
P2 = 5                               # pool2 output spatial
FC1_OUT, FC2_OUT, FC3_OUT = 120, 84, 10

LANES = 128
KPK = C1_IN * K1 * K1                # 75 conv1 patch columns (zero-padded to 128)
W1PAD = 16                           # pool1 width padded 14 -> 16 (tile aligned)
ROWS_IMG = 4 * P1 * W1PAD            # 896 conv1 im2col rows per image
C2ROWS = H2 * W1PAD                  # 160 conv2 output rows per image
FEAT_K = P2 * W1PAD * LANES          # 10240 packed fc1 input width (400 useful)
IMG_BLOCK = 8                        # max images per feature-kernel grid step


def _round_up(x, m):
    return (x + m - 1) // m * m


# ----------------------------- Pallas kernels ------------------------------ #

def _feature_kernel(p_ref, w1_ref, b1_ref, w2_ref, b2_ref, o_ref):
    """conv1+ReLU -> pool1 -> conv2+ReLU -> pool2 for a block of B images."""
    B = p_ref.shape[0]

    # conv1 for all B images and all four 2x2-pool candidate positions: ONE matmul.
    lhs = p_ref[...].reshape(B * ROWS_IMG, LANES)                       # bf16
    a1 = jnp.dot(lhs, w1_ref[...], preferred_element_type=jnp.float32)
    a1 = jnp.maximum(a1 + b1_ref[...], 0.0)                             # f32
    a1 = a1.reshape(B, 4, P1, W1PAD, LANES)

    # maxpool1 (2,2): elementwise max over the four candidate blocks.
    pool1 = jnp.maximum(jnp.maximum(a1[:, 0], a1[:, 1]),
                        jnp.maximum(a1[:, 2], a1[:, 3]))                # (B,14,16,128)

    # width-im2col: lane group j holds pool1 shifted left by j columns.
    pw = jnp.concatenate([pool1[:, :, j:j + H2, :] for j in range(K2)],
                         axis=-1).astype(jnp.bfloat16)                  # (B,14,10,640)
    pw = jnp.pad(pw, ((0, 0), (0, 0), (0, W1PAD - H2), (0, 0)))         # (B,14,16,640)
    pflat = pw.reshape(B, P1 * W1PAD, K2 * LANES)                       # (B,224,640)

    # conv2: one matmul per kernel row i (K = kw*cin = 640); all slices
    # start/stop on multiples of 16 rows so they are tile-aligned views.
    acc = jnp.zeros((B * C2ROWS, LANES), jnp.float32)
    for i in range(K2):
        lhs_i = pflat[:, W1PAD * i:W1PAD * i + C2ROWS, :]
        lhs_i = lhs_i.reshape(B * C2ROWS, K2 * LANES)
        acc = acc + jnp.dot(lhs_i, w2_ref[i], preferred_element_type=jnp.float32)
    a2 = jnp.maximum(acc + b2_ref[...], 0.0)                            # (B*160,128)

    # maxpool2 (2,2): pair adjacent output rows (leading split) then adjacent
    # columns (shift-by-one max).  Valid results land at even columns; the
    # other slots are finite junk matched by zero rows in the fc1 weight.
    a2 = a2.reshape(B, P2, 2, W1PAD, LANES)
    mr = jnp.maximum(a2[:, :, 0], a2[:, :, 1])                          # (B,5,16,128)
    sh = jnp.pad(mr[:, :, 1:, :], ((0, 0), (0, 0), (0, 1), (0, 0)))
    o_ref[...] = jnp.maximum(mr, sh).astype(jnp.bfloat16)               # (B,5,16,128)


def _fc_kernel(x_ref, w1_ref, b1_ref, w2_ref, b2_ref, w3_ref, b3_ref, o_ref):
    """fc1+ReLU -> fc2+ReLU -> fc3, fused, bf16 MXU inputs / f32 accumulation."""
    h = jnp.dot(x_ref[...], w1_ref[...], preferred_element_type=jnp.float32)
    h = jnp.maximum(h + b1_ref[...], 0.0).astype(jnp.bfloat16)
    h = jnp.dot(h, w2_ref[...], preferred_element_type=jnp.float32)
    h = jnp.maximum(h + b2_ref[...], 0.0).astype(jnp.bfloat16)
    h = jnp.dot(h, w3_ref[...], preferred_element_type=jnp.float32)
    o_ref[...] = h + b3_ref[...]


# --------------------------- host-side preparation -------------------------- #

def prepare_params(params):
    """Pad/permute PyTorch-layout weights into lane-dense kernel operands."""
    f32, bf16 = jnp.float32, jnp.bfloat16

    w1 = params["conv1_w"].reshape(C1_OUT, KPK).T                       # (75, 6)
    w1 = jnp.zeros((LANES, LANES), f32).at[:KPK, :C1_OUT].set(w1)
    b1 = jnp.zeros((1, LANES), f32).at[0, :C1_OUT].set(params["conv1_b"])

    w2 = params["conv2_w"].transpose(2, 3, 1, 0)                        # (kh,kw,cin,cout)
    w2 = jnp.zeros((K2, K2, LANES, LANES), f32).at[:, :, :C2_IN, :C2_OUT].set(w2)
    w2 = w2.reshape(K2, K2 * LANES, LANES)                              # row = kw*128+cin
    b2 = jnp.zeros((1, LANES), f32).at[0, :C2_OUT].set(params["conv2_b"])

    # fc1: PyTorch input index c*25 + qh*5 + qw  ->  feature row qh*16 + 2*qw, lane c.
    wf1 = params["fc1_w"].reshape(FC1_OUT, C2_OUT, P2, P2).transpose(2, 3, 1, 0)
    big = jnp.zeros((P2, W1PAD, LANES, LANES), f32)
    big = big.at[:, 0:2 * P2:2, :C2_OUT, :FC1_OUT].set(wf1)
    wf1 = big.reshape(FEAT_K, LANES)
    bf1 = jnp.zeros((1, LANES), f32).at[0, :FC1_OUT].set(params["fc1_b"])

    wf2 = jnp.zeros((LANES, LANES), f32).at[:FC1_OUT, :FC2_OUT].set(params["fc2_w"].T)
    bf2 = jnp.zeros((1, LANES), f32).at[0, :FC2_OUT].set(params["fc2_b"])
    wf3 = jnp.zeros((LANES, LANES), f32).at[:FC2_OUT, :FC3_OUT].set(params["fc3_w"].T)
    bf3 = jnp.zeros((1, LANES), f32).at[0, :FC3_OUT].set(params["fc3_b"])

    return dict(w1=w1.astype(bf16), b1=b1,
                w2=w2.astype(bf16), b2=b2,
                wf1=wf1.astype(bf16), bf1=bf1,
                wf2=wf2.astype(bf16), bf2=bf2,
                wf3=wf3.astype(bf16), bf3=bf3)


def conv1_patches(x):
    """NCHW (N,3,32,32) -> (N, 896, 128) bf16 conv1 im2col patches.
    Row = k*224 + oh1*16 + ow1 where k = dh*2+dw is the 2x2-pool candidate and
    (oh1, ow1) the pool1 position (ow1 padded 14->16); column = c*25+ki*5+kj
    (75 used, zero pad to 128)."""
    N = x.shape[0]
    cols = []
    for c in range(C1_IN):
        for ki in range(K1):
            for kj in range(K1):
                cols.append(x[:, c, ki:ki + H1, kj:kj + H1])            # (N, 28, 28)
    pat = jnp.stack(cols, axis=-1)                                      # (N,28,28,75)
    pat = pat.reshape(N, P1, 2, P1, 2, KPK)                             # y=2oh1+dh, x=2ow1+dw
    pat = pat.transpose(0, 2, 4, 1, 3, 5)                               # (N,dh,dw,oh1,ow1,75)
    pat = pat.reshape(N, 4, P1, P1, KPK)
    pat = jnp.pad(pat, ((0, 0), (0, 0), (0, 0),
                        (0, W1PAD - P1), (0, LANES - KPK)))
    return pat.reshape(N, ROWS_IMG, LANES).astype(jnp.bfloat16)


# ------------------------------- pallas wrappers ---------------------------- #

def _extract_features(patches, kp, img_block):
    npad = patches.shape[0]
    return pl.pallas_call(
        _feature_kernel,
        out_shape=jax.ShapeDtypeStruct((npad, P2, W1PAD, LANES), jnp.bfloat16),
        grid=(npad // img_block,),
        in_specs=[
            pl.BlockSpec((img_block, ROWS_IMG, LANES), lambda n: (n, 0, 0)),
            pl.BlockSpec((LANES, LANES), lambda n: (0, 0)),
            pl.BlockSpec((1, LANES), lambda n: (0, 0)),
            pl.BlockSpec((K2, K2 * LANES, LANES), lambda n: (0, 0, 0)),
            pl.BlockSpec((1, LANES), lambda n: (0, 0)),
        ],
        out_specs=pl.BlockSpec((img_block, P2, W1PAD, LANES),
                               lambda n: (n, 0, 0, 0)),
        compiler_params=pltpu.CompilerParams(
            dimension_semantics=("parallel",),
            vmem_limit_bytes=48 * 1024 * 1024),
    )(patches, kp["w1"], kp["b1"], kp["w2"], kp["b2"])


def _fc_head(feats, kp):
    nrows = feats.shape[0]
    x = feats.reshape(nrows, FEAT_K)
    bm = 256 if nrows >= 256 else _round_up(nrows, 16)
    m_pad = _round_up(nrows, bm)
    if m_pad != nrows:
        x = jnp.pad(x, ((0, m_pad - nrows), (0, 0)))
    return pl.pallas_call(
        _fc_kernel,
        out_shape=jax.ShapeDtypeStruct((m_pad, LANES), jnp.float32),
        grid=(m_pad // bm,),
        in_specs=[
            pl.BlockSpec((bm, FEAT_K), lambda m: (m, 0)),
            pl.BlockSpec((FEAT_K, LANES), lambda m: (0, 0)),
            pl.BlockSpec((1, LANES), lambda m: (0, 0)),
            pl.BlockSpec((LANES, LANES), lambda m: (0, 0)),
            pl.BlockSpec((1, LANES), lambda m: (0, 0)),
            pl.BlockSpec((LANES, LANES), lambda m: (0, 0)),
            pl.BlockSpec((1, LANES), lambda m: (0, 0)),
        ],
        out_specs=pl.BlockSpec((bm, LANES), lambda m: (m, 0)),
        compiler_params=pltpu.CompilerParams(
            dimension_semantics=("parallel",),
            vmem_limit_bytes=48 * 1024 * 1024),
    )(x, kp["wf1"], kp["bf1"], kp["wf2"], kp["bf2"], kp["wf3"], kp["bf3"])


@jax.jit
def convnet_forward(kernel_params, x):
    n = x.shape[0]
    b = min(IMG_BLOCK, n)
    npad = _round_up(n, b)
    patches = conv1_patches(x)
    if npad != n:
        patches = jnp.pad(patches, ((0, npad - n), (0, 0), (0, 0)))
    feats = _extract_features(patches, kernel_params, b)
    logits = _fc_head(feats, kernel_params)
    return logits[:n, :FC3_OUT]


# ----------------------------- reference & init ----------------------------- #

def init_params(key):
    """Deterministic init mimicking PyTorch's default U(-1/sqrt(fan_in), ...)."""
    def uniform(k, shape, fan_in):
        bound = 1.0 / float(fan_in) ** 0.5
        return jax.random.uniform(k, shape, jnp.float32, -bound, bound)

    ks = jax.random.split(key, 10)
    return {
        "conv1_w": uniform(ks[0], (6, 3, 5, 5), 3 * 5 * 5),
        "conv1_b": uniform(ks[1], (6,), 3 * 5 * 5),
        "conv2_w": uniform(ks[2], (16, 6, 5, 5), 6 * 5 * 5),
        "conv2_b": uniform(ks[3], (16,), 6 * 5 * 5),
        "fc1_w": uniform(ks[4], (120, 16 * 5 * 5), 16 * 5 * 5),
        "fc1_b": uniform(ks[5], (120,), 16 * 5 * 5),
        "fc2_w": uniform(ks[6], (84, 120), 120),
        "fc2_b": uniform(ks[7], (84,), 120),
        "fc3_w": uniform(ks[8], (10, 84), 84),
        "fc3_b": uniform(ks[9], (10,), 84),
    }


@jax.jit
def reference_forward(params, x):
    """Pure-JAX f32 reference of the PyTorch module (sanity check)."""
    def conv(h, w, b):
        y = jax.lax.conv_general_dilated(h, w, (1, 1), "VALID",
                                         dimension_numbers=("NCHW", "OIHW", "NCHW"))
        return jax.nn.relu(y + b[None, :, None, None])

    def pool(h):
        return jax.lax.reduce_window(h, -jnp.inf, jax.lax.max,
                                     (1, 1, 2, 2), (1, 1, 2, 2), "VALID")

    h = pool(conv(x, params["conv1_w"], params["conv1_b"]))
    h = pool(conv(h, params["conv2_w"], params["conv2_b"]))
    h = h.reshape(h.shape[0], -1)
    h = jax.nn.relu(h @ params["fc1_w"].T + params["fc1_b"])
    h = jax.nn.relu(h @ params["fc2_w"].T + params["fc2_b"])
    return h @ params["fc3_w"].T + params["fc3_b"]


if __name__ == "__main__":
    key = jax.random.PRNGKey(0)
    k_params, k_x = jax.random.split(key)
    params = init_params(k_params)
    # Channels=3 and 32x32 spatial are fixed by the module (16*5*5 flatten).
    x = jax.random.normal(k_x, (2, 3, 32, 32), dtype=jnp.float32)

    kparams = prepare_params(params)
    out = jax.block_until_ready(convnet_forward(kparams, x))
    assert out.shape == (2, 10), out.shape

    ref = jax.block_until_ready(reference_forward(params, x))
    err = float(jnp.max(jnp.abs(out - ref.astype(jnp.float32))))
    assert err < 5e-2, f"max abs error vs f32 reference too large: {err}"
    print("KERNEL_OK")
</pallas_src>

<mosaic_0001>
module attributes {stable_mosaic.version = 11 : i64} {
  func.func @_feature_kernel(%arg0: i32, %arg1: memref<2x896x128xbf16, #tpu.memory_space<vmem>>, %arg2: memref<128x128xbf16, #tpu.memory_space<vmem>>, %arg3: memref<1x128xf32, #tpu.memory_space<vmem>>, %arg4: memref<5x640x128xbf16, #tpu.memory_space<vmem>>, %arg5: memref<1x128xf32, #tpu.memory_space<vmem>>, %arg6: memref<2x5x16x128xbf16, #tpu.memory_space<vmem>>) attributes {dimension_semantics = [#tpu.dimension_semantics<parallel>], iteration_bounds = array<i64: 1>, scalar_prefetch = 0 : i64, scratch_operands = 0 : i64, tpu.core_type = #tpu.core_type<tc>, window_params = [{transform_indices = @transform_0, window_bounds = array<i64: 2, 896, 128>}, {pipeline_mode = #tpu.pipeline_mode<synchronous>, transform_indices = @transform_1, window_bounds = array<i64: 128, 128>}, {pipeline_mode = #tpu.pipeline_mode<synchronous>, transform_indices = @transform_2, window_bounds = array<i64: 1, 128>}, {pipeline_mode = #tpu.pipeline_mode<synchronous>, transform_indices = @transform_3, window_bounds = array<i64: 5, 640, 128>}, {pipeline_mode = #tpu.pipeline_mode<synchronous>, transform_indices = @transform_4, window_bounds = array<i64: 1, 128>}, {transform_indices = @transform_5, window_bounds = array<i64: 2, 5, 16, 128>}]} {
    %c0 = arith.constant 0 : index
    %c0_0 = arith.constant 0 : index
    %c0_1 = arith.constant 0 : index
    %0 = vector.load %arg1[%c0, %c0_0, %c0_1] : memref<2x896x128xbf16, #tpu.memory_space<vmem>>, vector<2x896x128xbf16>
    %1 = vector.shape_cast %0 : vector<2x896x128xbf16> to vector<1792x128xbf16>
    %c0_2 = arith.constant 0 : index
    %c0_3 = arith.constant 0 : index
    %2 = vector.load %arg2[%c0_2, %c0_3] : memref<128x128xbf16, #tpu.memory_space<vmem>>, vector<128x128xbf16>
    %cst = arith.constant dense<0.000000e+00> : vector<1792x128xf32>
    %3 = tpu.matmul %1, %2, %cst {dimension_numbers = #tpu.dot_dimension_numbers<[1], [0], [0], [1], [0, 0, 1, 1], [], []>} : vector<1792x128xbf16>, vector<128x128xbf16>, vector<1792x128xf32> -> vector<1792x128xf32>
    %c0_4 = arith.constant 0 : index
    %c0_5 = arith.constant 0 : index
    %4 = vector.load %arg3[%c0_4, %c0_5] : memref<1x128xf32, #tpu.memory_space<vmem>>, vector<1x128xf32>
    %5 = vector.broadcast %4 : vector<1x128xf32> to vector<1792x128xf32>
    %6 = arith.addf %3, %5 : vector<1792x128xf32>
    %cst_6 = arith.constant 0.000000e+00 : f32
    %7 = vector.broadcast %cst_6 : f32 to vector<1792x128xf32>
    %8 = arith.maximumf %6, %7 : vector<1792x128xf32>
    %9 = vector.shape_cast %8 : vector<1792x128xf32> to vector<2x4x14x16x128xf32>
    %10 = vector.extract_strided_slice %9 {offsets = [0, 0, 0, 0, 0], sizes = [2, 1, 14, 16, 128], strides = [1, 1, 1, 1, 1]} : vector<2x4x14x16x128xf32> to vector<2x1x14x16x128xf32>
    %11 = vector.shape_cast %10 : vector<2x1x14x16x128xf32> to vector<2x14x16x128xf32>
    %12 = vector.extract_strided_slice %9 {offsets = [0, 1, 0, 0, 0], sizes = [2, 1, 14, 16, 128], strides = [1, 1, 1, 1, 1]} : vector<2x4x14x16x128xf32> to vector<2x1x14x16x128xf32>
    %13 = vector.shape_cast %12 : vector<2x1x14x16x128xf32> to vector<2x14x16x128xf32>
    %14 = arith.maximumf %11, %13 : vector<2x14x16x128xf32>
    %15 = vector.extract_strided_slice %9 {offsets = [0, 2, 0, 0, 0], sizes = [2, 1, 14, 16, 128], strides = [1, 1, 1, 1, 1]} : vector<2x4x14x16x128xf32> to vector<2x1x14x16x128xf32>
    %16 = vector.shape_cast %15 : vector<2x1x14x16x128xf32> to vector<2x14x16x128xf32>
    %17 = vector.extract_strided_slice %9 {offsets = [0, 3, 0, 0, 0], sizes = [2, 1, 14, 16, 128], strides = [1, 1, 1, 1, 1]} : vector<2x4x14x16x128xf32> to vector<2x1x14x16x128xf32>
    %18 = vector.shape_cast %17 : vector<2x1x14x16x128xf32> to vector<2x14x16x128xf32>
    %19 = arith.maximumf %16, %18 : vector<2x14x16x128xf32>
    %20 = arith.maximumf %14, %19 : vector<2x14x16x128xf32>
    %21 = vector.extract_strided_slice %20 {offsets = [0, 0, 0, 0], sizes = [2, 14, 10, 128], strides = [1, 1, 1, 1]} : vector<2x14x16x128xf32> to vector<2x14x10x128xf32>
    %22 = vector.extract_strided_slice %20 {offsets = [0, 0, 1, 0], sizes = [2, 14, 10, 128], strides = [1, 1, 1, 1]} : vector<2x14x16x128xf32> to vector<2x14x10x128xf32>
    %23 = vector.extract_strided_slice %20 {offsets = [0, 0, 2, 0], sizes = [2, 14, 10, 128], strides = [1, 1, 1, 1]} : vector<2x14x16x128xf32> to vector<2x14x10x128xf32>
    %24 = vector.extract_strided_slice %20 {offsets = [0, 0, 3, 0], sizes = [2, 14, 10, 128], strides = [1, 1, 1, 1]} : vector<2x14x16x128xf32> to vector<2x14x10x128xf32>
    %25 = vector.extract_strided_slice %20 {offsets = [0, 0, 4, 0], sizes = [2, 14, 10, 128], strides = [1, 1, 1, 1]} : vector<2x14x16x128xf32> to vector<2x14x10x128xf32>
    %26 = tpu.concatenate %21, %22, %23, %24, %25 in 3 : vector<2x14x10x128xf32>, vector<2x14x10x128xf32>, vector<2x14x10x128xf32>, vector<2x14x10x128xf32>, vector<2x14x10x128xf32> -> vector<2x14x10x640xf32>
    %27 = arith.truncf %26 : vector<2x14x10x640xf32> to vector<2x14x10x640xbf16>
    %c0_i32 = arith.constant 0 : i32
    %28 = arith.sitofp %c0_i32 : i32 to bf16
    %29 = vector.broadcast %28 : bf16 to vector<2x14x6x640xbf16>
    %30 = tpu.concatenate %27, %29 in 2 : vector<2x14x10x640xbf16>, vector<2x14x6x640xbf16> -> vector<2x14x16x640xbf16>
    %31 = vector.shape_cast %30 : vector<2x14x16x640xbf16> to vector<2x224x640xbf16>
    %cst_7 = arith.constant 0.000000e+00 : f32
    %32 = vector.broadcast %cst_7 : f32 to vector<320x128xf32>
    %33 = vector.extract_strided_slice %31 {offsets = [0, 0, 0], sizes = [2, 160, 640], strides = [1, 1, 1]} : vector<2x224x640xbf16> to vector<2x160x640xbf16>
    %34 = vector.shape_cast %33 : vector<2x160x640xbf16> to vector<320x640xbf16>
    %c0_8 = arith.constant 0 : index
    %c0_9 = arith.constant 0 : index
    %c0_10 = arith.constant 0 : index
    %35 = vector.load %arg4[%c0_8, %c0_9, %c0_10] : memref<5x640x128xbf16, #tpu.memory_space<vmem>>, vector<1x640x128xbf16>
    %36 = vector.shape_cast %35 : vector<1x640x128xbf16> to vector<640x128xbf16>
    %cst_11 = arith.constant dense<0.000000e+00> : vector<320x128xf32>
    %37 = tpu.matmul %34, %36, %cst_11 {dimension_numbers = #tpu.dot_dimension_numbers<[1], [0], [0], [1], [0, 0, 1, 1], [], []>} : vector<320x640xbf16>, vector<640x128xbf16>, vector<320x128xf32> -> vector<320x128xf32>
    %38 = arith.addf %32, %37 : vector<320x128xf32>
    %39 = vector.extract_strided_slice %31 {offsets = [0, 16, 0], sizes = [2, 160, 640], strides = [1, 1, 1]} : vector<2x224x640xbf16> to vector<2x160x640xbf16>
    %40 = vector.shape_cast %39 : vector<2x160x640xbf16> to vector<320x640xbf16>
    %c1 = arith.constant 1 : index
    %c0_12 = arith.constant 0 : index
    %c0_13 = arith.constant 0 : index
    %41 = vector.load %arg4[%c1, %c0_12, %c0_13] : memref<5x640x128xbf16, #tpu.memory_space<vmem>>, vector<1x640x128xbf16>
    %42 = vector.shape_cast %41 : vector<1x640x128xbf16> to vector<640x128xbf16>
    %cst_14 = arith.constant dense<0.000000e+00> : vector<320x128xf32>
    %43 = tpu.matmul %40, %42, %cst_14 {dimension_numbers = #tpu.dot_dimension_numbers<[1], [0], [0], [1], [0, 0, 1, 1], [], []>} : vector<320x640xbf16>, vector<640x128xbf16>, vector<320x128xf32> -> vector<320x128xf32>
    %44 = arith.addf %38, %43 : vector<320x128xf32>
    %45 = vector.extract_strided_slice %31 {offsets = [0, 32, 0], sizes = [2, 160, 640], strides = [1, 1, 1]} : vector<2x224x640xbf16> to vector<2x160x640xbf16>
    %46 = vector.shape_cast %45 : vector<2x160x640xbf16> to vector<320x640xbf16>
    %c2 = arith.constant 2 : index
    %c0_15 = arith.constant 0 : index
    %c0_16 = arith.constant 0 : index
    %47 = vector.load %arg4[%c2, %c0_15, %c0_16] : memref<5x640x128xbf16, #tpu.memory_space<vmem>>, vector<1x640x128xbf16>
    %48 = vector.shape_cast %47 : vector<1x640x128xbf16> to vector<640x128xbf16>
    %cst_17 = arith.constant dense<0.000000e+00> : vector<320x128xf32>
    %49 = tpu.matmul %46, %48, %cst_17 {dimension_numbers = #tpu.dot_dimension_numbers<[1], [0], [0], [1], [0, 0, 1, 1], [], []>} : vector<320x640xbf16>, vector<640x128xbf16>, vector<320x128xf32> -> vector<320x128xf32>
    %50 = arith.addf %44, %49 : vector<320x128xf32>
    %51 = vector.extract_strided_slice %31 {offsets = [0, 48, 0], sizes = [2, 160, 640], strides = [1, 1, 1]} : vector<2x224x640xbf16> to vector<2x160x640xbf16>
    %52 = vector.shape_cast %51 : vector<2x160x640xbf16> to vector<320x640xbf16>
    %c3 = arith.constant 3 : index
    %c0_18 = arith.constant 0 : index
    %c0_19 = arith.constant 0 : index
    %53 = vector.load %arg4[%c3, %c0_18, %c0_19] : memref<5x640x128xbf16, #tpu.memory_space<vmem>>, vector<1x640x128xbf16>
    %54 = vector.shape_cast %53 : vector<1x640x128xbf16> to vector<640x128xbf16>
    %cst_20 = arith.constant dense<0.000000e+00> : vector<320x128xf32>
    %55 = tpu.matmul %52, %54, %cst_20 {dimension_numbers = #tpu.dot_dimension_numbers<[1], [0], [0], [1], [0, 0, 1, 1], [], []>} : vector<320x640xbf16>, vector<640x128xbf16>, vector<320x128xf32> -> vector<320x128xf32>
    %56 = arith.addf %50, %55 : vector<320x128xf32>
    %57 = vector.extract_strided_slice %31 {offsets = [0, 64, 0], sizes = [2, 160, 640], strides = [1, 1, 1]} : vector<2x224x640xbf16> to vector<2x160x640xbf16>
    %58 = vector.shape_cast %57 : vector<2x160x640xbf16> to vector<320x640xbf16>
    %c4 = arith.constant 4 : index
    %c0_21 = arith.constant 0 : index
    %c0_22 = arith.constant 0 : index
    %59 = vector.load %arg4[%c4, %c0_21, %c0_22] : memref<5x640x128xbf16, #tpu.memory_space<vmem>>, vector<1x640x128xbf16>
    %60 = vector.shape_cast %59 : vector<1x640x128xbf16> to vector<640x128xbf16>
    %cst_23 = arith.constant dense<0.000000e+00> : vector<320x128xf32>
    %61 = tpu.matmul %58, %60, %cst_23 {dimension_numbers = #tpu.dot_dimension_numbers<[1], [0], [0], [1], [0, 0, 1, 1], [], []>} : vector<320x640xbf16>, vector<640x128xbf16>, vector<320x128xf32> -> vector<320x128xf32>
    %62 = arith.addf %56, %61 : vector<320x128xf32>
    %c0_24 = arith.constant 0 : index
    %c0_25 = arith.constant 0 : index
    %63 = vector.load %arg5[%c0_24, %c0_25] : memref<1x128xf32, #tpu.memory_space<vmem>>, vector<1x128xf32>
    %64 = vector.broadcast %63 : vector<1x128xf32> to vector<320x128xf32>
    %65 = arith.addf %62, %64 : vector<320x128xf32>
    %cst_26 = arith.constant 0.000000e+00 : f32
    %66 = vector.broadcast %cst_26 : f32 to vector<320x128xf32>
    %67 = arith.maximumf %65, %66 : vector<320x128xf32>
    %68 = vector.shape_cast %67 : vector<320x128xf32> to vector<2x5x2x16x128xf32>
    %69 = vector.extract_strided_slice %68 {offsets = [0, 0, 0, 0, 0], sizes = [2, 5, 1, 16, 128], strides = [1, 1, 1, 1, 1]} : vector<2x5x2x16x128xf32> to vector<2x5x1x16x128xf32>
    %70 = vector.shape_cast %69 : vector<2x5x1x16x128xf32> to vector<2x5x16x128xf32>
    %71 = vector.extract_strided_slice %68 {offsets = [0, 0, 1, 0, 0], sizes = [2, 5, 1, 16, 128], strides = [1, 1, 1, 1, 1]} : vector<2x5x2x16x128xf32> to vector<2x5x1x16x128xf32>
    %72 = vector.shape_cast %71 : vector<2x5x1x16x128xf32> to vector<2x5x16x128xf32>
    %73 = arith.maximumf %70, %72 : vector<2x5x16x128xf32>
    %74 = vector.extract_strided_slice %73 {offsets = [0, 0, 1, 0], sizes = [2, 5, 15, 128], strides = [1, 1, 1, 1]} : vector<2x5x16x128xf32> to vector<2x5x15x128xf32>
    %c0_i32_27 = arith.constant 0 : i32
    %75 = arith.sitofp %c0_i32_27 : i32 to f32
    %76 = vector.broadcast %75 : f32 to vector<2x5x1x128xf32>
    %77 = tpu.concatenate %74, %76 in 2 : vector<2x5x15x128xf32>, vector<2x5x1x128xf32> -> vector<2x5x16x128xf32>
    %78 = arith.maximumf %73, %77 : vector<2x5x16x128xf32>
    %79 = arith.truncf %78 : vector<2x5x16x128xf32> to vector<2x5x16x128xbf16>
    %c0_28 = arith.constant 0 : index
    %c0_29 = arith.constant 0 : index
    %c0_30 = arith.constant 0 : index
    %c0_31 = arith.constant 0 : index
    %80 = vector.load %arg6[%c0_28, %c0_29, %c0_30, %c0_31] : memref<2x5x16x128xbf16, #tpu.memory_space<vmem>>, vector<2x5x16x128xbf16>
    tpu.vector_store %arg6[%c0_28, %c0_29, %c0_30, %c0_31], %79 {strides = array<i32>} : memref<2x5x16x128xbf16, #tpu.memory_space<vmem>>, vector<2x5x16x128xbf16>,
    return
  }
  func.func @transform_0(%arg0: i32) -> (i32, i32, i32) {
    %c0_i32 = arith.constant 0 : i32
    %c0_i32_0 = arith.constant 0 : i32
    %c0_i32_1 = arith.constant 0 : i32
    return %arg0, %c0_i32, %c0_i32_0 : i32, i32, i32
  }
  func.func @transform_1(%arg0: i32) -> (i32, i32) {
    %c0_i32 = arith.constant 0 : i32
    %c0_i32_0 = arith.constant 0 : i32
    %c0_i32_1 = arith.constant 0 : i32
    return %c0_i32, %c0_i32_0 : i32, i32
  }
  func.func @transform_2(%arg0: i32) -> (i32, i32) {
    %c0_i32 = arith.constant 0 : i32
    %c0_i32_0 = arith.constant 0 : i32
    %c0_i32_1 = arith.constant 0 : i32
    return %c0_i32, %c0_i32_0 : i32, i32
  }
  func.func @transform_3(%arg0: i32) -> (i32, i32, i32) {
    %c0_i32 = arith.constant 0 : i32
    %c0_i32_0 = arith.constant 0 : i32
    %c0_i32_1 = arith.constant 0 : i32
    %c0_i32_2 = arith.constant 0 : i32
    return %c0_i32, %c0_i32_0, %c0_i32_1 : i32, i32, i32
  }
  func.func @transform_4(%arg0: i32) -> (i32, i32) {
    %c0_i32 = arith.constant 0 : i32
    %c0_i32_0 = arith.constant 0 : i32
    %c0_i32_1 = arith.constant 0 : i32
    return %c0_i32, %c0_i32_0 : i32, i32
  }
  func.func @transform_5(%arg0: i32) -> (i32, i32, i32, i32) {
    %c0_i32 = arith.constant 0 : i32
    %c0_i32_0 = arith.constant 0 : i32
    %c0_i32_1 = arith.constant 0 : i32
    %c0_i32_2 = arith.constant 0 : i32
    return %arg0, %c0_i32, %c0_i32_0, %c0_i32_1 : i32, i32, i32, i32
  }
}

module attributes {stable_mosaic.version = 11 : i64} {
  func.func @_fc_kernel(%arg0: i32, %arg1: memref<16x10240xbf16, #tpu.memory_space<vmem>>, %arg2: memref<10240x128xbf16, #tpu.memory_space<vmem>>, %arg3: memref<1x128xf32, #tpu.memory_space<vmem>>, %arg4: memref<128x128xbf16, #tpu.memory_space<vmem>>, %arg5: memref<1x128xf32, #tpu.memory_space<vmem>>, %arg6: memref<128x128xbf16, #tpu.memory_space<vmem>>, %arg7: memref<1x128xf32, #tpu.memory_space<vmem>>, %arg8: memref<16x128xf32, #tpu.memory_space<vmem>>) attributes {dimension_semantics = [#tpu.dimension_semantics<parallel>], iteration_bounds = array<i64: 1>, scalar_prefetch = 0 : i64, scratch_operands = 0 : i64, tpu.core_type = #tpu.core_type<tc>, window_params = [{transform_indices = @transform_0, window_bounds = array<i64: 16, 10240>}, {pipeline_mode = #tpu.pipeline_mode<synchronous>, transform_indices = @transform_1, window_bounds = array<i64: 10240, 128>}, {pipeline_mode = #tpu.pipeline_mode<synchronous>, transform_indices = @transform_2, window_bounds = array<i64: 1, 128>}, {pipeline_mode = #tpu.pipeline_mode<synchronous>, transform_indices = @transform_3, window_bounds = array<i64: 128, 128>}, {pipeline_mode = #tpu.pipeline_mode<synchronous>, transform_indices = @transform_4, window_bounds = array<i64: 1, 128>}, {pipeline_mode = #tpu.pipeline_mode<synchronous>, transform_indices = @transform_5, window_bounds = array<i64: 128, 128>}, {pipeline_mode = #tpu.pipeline_mode<synchronous>, transform_indices = @transform_6, window_bounds = array<i64: 1, 128>}, {transform_indices = @transform_7, window_bounds = array<i64: 16, 128>}]} {
    %c0 = arith.constant 0 : index
    %c0_0 = arith.constant 0 : index
    %0 = vector.load %arg1[%c0, %c0_0] : memref<16x10240xbf16, #tpu.memory_space<vmem>>, vector<16x10240xbf16>
    %c0_1 = arith.constant 0 : index
    %c0_2 = arith.constant 0 : index
    %1 = vector.load %arg2[%c0_1, %c0_2] : memref<10240x128xbf16, #tpu.memory_space<vmem>>, vector<10240x128xbf16>
    %cst = arith.constant dense<0.000000e+00> : vector<16x128xf32>
    %2 = tpu.matmul %0, %1, %cst {dimension_numbers = #tpu.dot_dimension_numbers<[1], [0], [0], [1], [0, 0, 1, 1], [], []>} : vector<16x10240xbf16>, vector<10240x128xbf16>, vector<16x128xf32> -> vector<16x128xf32>
    %c0_3 = arith.constant 0 : index
    %c0_4 = arith.constant 0 : index
    %3 = vector.load %arg3[%c0_3, %c0_4] : memref<1x128xf32, #tpu.memory_space<vmem>>, vector<1x128xf32>
    %4 = vector.broadcast %3 : vector<1x128xf32> to vector<16x128xf32>
    %5 = arith.addf %2, %4 : vector<16x128xf32>
    %cst_5 = arith.constant 0.000000e+00 : f32
    %6 = vector.broadcast %cst_5 : f32 to vector<16x128xf32>
    %7 = arith.maximumf %5, %6 : vector<16x128xf32>
    %8 = arith.truncf %7 : vector<16x128xf32> to vector<16x128xbf16>
    %c0_6 = arith.constant 0 : index
    %c0_7 = arith.constant 0 : index
    %9 = vector.load %arg4[%c0_6, %c0_7] : memref<128x128xbf16, #tpu.memory_space<vmem>>, vector<128x128xbf16>
    %cst_8 = arith.constant dense<0.000000e+00> : vector<16x128xf32>
    %10 = tpu.matmul %8, %9, %cst_8 {dimension_numbers = #tpu.dot_dimension_numbers<[1], [0], [0], [1], [0, 0, 1, 1], [], []>} : vector<16x128xbf16>, vector<128x128xbf16>, vector<16x128xf32> -> vector<16x128xf32>
    %c0_9 = arith.constant 0 : index
    %c0_10 = arith.constant 0 : index
    %11 = vector.load %arg5[%c0_9, %c0_10] : memref<1x128xf32, #tpu.memory_space<vmem>>, vector<1x128xf32>
    %12 = vector.broadcast %11 : vector<1x128xf32> to vector<16x128xf32>
    %13 = arith.addf %10, %12 : vector<16x128xf32>
    %cst_11 = arith.constant 0.000000e+00 : f32
    %14 = vector.broadcast %cst_11 : f32 to vector<16x128xf32>
    %15 = arith.maximumf %13, %14 : vector<16x128xf32>
    %16 = arith.truncf %15 : vector<16x128xf32> to vector<16x128xbf16>
    %c0_12 = arith.constant 0 : index
    %c0_13 = arith.constant 0 : index
    %17 = vector.load %arg6[%c0_12, %c0_13] : memref<128x128xbf16, #tpu.memory_space<vmem>>, vector<128x128xbf16>
    %cst_14 = arith.constant dense<0.000000e+00> : vector<16x128xf32>
    %18 = tpu.matmul %16, %17, %cst_14 {dimension_numbers = #tpu.dot_dimension_numbers<[1], [0], [0], [1], [0, 0, 1, 1], [], []>} : vector<16x128xbf16>, vector<128x128xbf16>, vector<16x128xf32> -> vector<16x128xf32>
    %c0_15 = arith.constant 0 : index
    %c0_16 = arith.constant 0 : index
    %19 = vector.load %arg7[%c0_15, %c0_16] : memref<1x128xf32, #tpu.memory_space<vmem>>, vector<1x128xf32>
    %20 = vector.broadcast %19 : vector<1x128xf32> to vector<16x128xf32>
    %21 = arith.addf %18, %20 : vector<16x128xf32>
    %c0_17 = arith.constant 0 : index
    %c0_18 = arith.constant 0 : index
    %22 = vector.load %arg8[%c0_17, %c0_18] : memref<16x128xf32, #tpu.memory_space<vmem>>, vector<16x128xf32>
    tpu.vector_store %arg8[%c0_17, %c0_18], %21 {strides = array<i32>} : memref<16x128xf32, #tpu.memory_space<vmem>>, vector<16x128xf32>,
    return
  }
  func.func @transform_0(%arg0: i32) -> (i32, i32) {
    %c0_i32 = arith.constant 0 : i32
    %c0_i32_0 = arith.constant 0 : i32
    return %arg0, %c0_i32 : i32, i32
  }
  func.func @transform_1(%arg0: i32) -> (i32, i32) {
    %c0_i32 = arith.constant 0 : i32
    %c0_i32_0 = arith.constant 0 : i32
    %c0_i32_1 = arith.constant 0 : i32
    return %c0_i32, %c0_i32_0 : i32, i32
  }
  func.func @transform_2(%arg0: i32) -> (i32, i32) {
    %c0_i32 = arith.constant 0 : i32
    %c0_i32_0 = arith.constant 0 : i32
    %c0_i32_1 = arith.constant 0 : i32
    return %c0_i32, %c0_i32_0 : i32, i32
  }
  func.func @transform_3(%arg0: i32) -> (i32, i32) {
    %c0_i32 = arith.constant 0 : i32
    %c0_i32_0 = arith.constant 0 : i32
    %c0_i32_1 = arith.constant 0 : i32
    return %c0_i32, %c0_i32_0 : i32, i32
  }
  func.func @transform_4(%arg0: i32) -> (i32, i32) {
    %c0_i32 = arith.constant 0 : i32
    %c0_i32_0 = arith.constant 0 : i32
    %c0_i32_1 = arith.constant 0 : i32
    return %c0_i32, %c0_i32_0 : i32, i32
  }
  func.func @transform_5(%arg0: i32) -> (i32, i32) {
    %c0_i32 = arith.constant 0 : i32
    %c0_i32_0 = arith.constant 0 : i32
    %c0_i32_1 = arith.constant 0 : i32
    return %c0_i32, %c0_i32_0 : i32, i32
  }
  func.func @transform_6(%arg0: i32) -> (i32, i32) {
    %c0_i32 = arith.constant 0 : i32
    %c0_i32_0 = arith.constant 0 : i32
    %c0_i32_1 = arith.constant 0 : i32
    return %c0_i32, %c0_i32_0 : i32, i32
  }
  func.func @transform_7(%arg0: i32) -> (i32, i32) {
    %c0_i32 = arith.constant 0 : i32
    %c0_i32_0 = arith.constant 0 : i32
    return %arg0, %c0_i32 : i32, i32
  }
}

</mosaic_0001>

<llo_original>
// kernel: convnet_forward.2
$region0: #{convnet_forward.2}
  #allocation0 [shape = 'u32[]', space=smem, size = 0x4, offset = 0x4, fixed_abs, tag = 'smem constant byte address 0x4 - core index']
  #allocation1 [shape = 'u32[144,128]{1,0:T(1,128)}', space=vmem, size = 0x12000, scoped, tag = 'internal scratch']
  %s0 = inlined_call_operand.vmem [shape: bf16[2,896,128], index: 0, kind: input, shape index: {}]
  %s1 = inlined_call_operand.vmem [shape: bf16[128,128], index: 1, kind: input, shape index: {}]
  %s2 = inlined_call_operand.vmem [shape: f32[1,128], index: 2, kind: input, shape index: {}]
  %s3 = inlined_call_operand.vmem [shape: bf16[5,640,128], index: 3, kind: input, shape index: {}]
  %s4 = inlined_call_operand.vmem [shape: f32[1,128], index: 4, kind: input, shape index: {}]
  %s5 = inlined_call_operand.vmem [shape: bf16[2,5,16,128], index: 5, kind: output, shape index: {}]
  %s6 = sld [smem:[#allocation0]]
  $region30: #{convnet_forward.2} parent=0
    _
  %s8 = ssub.s32 1, %s6
  %s9 = scalar_select 0, %s8, %s6
  // Predicated region
  $region2: #{convnet_forward.2} parent=0 // pred_check
    _
  $region3: #{convnet_forward.2} parent=0 // pred_check_branch
    %11 = sbr.rel (0) target = $region5
  $region4: #{convnet_forward.2} parent=0 // pred_region
    _
  $region5: #{convnet_forward.2} parent=0 // pred_fallthru
    _
  // Predicated region
  $region6: #{convnet_forward.2} parent=0 // pred_check
    _
  $region7: #{convnet_forward.2} parent=0 // pred_check_branch
    %13 = sbr.rel (0) target = $region9
  $region8: #{convnet_forward.2} parent=0 // pred_region
    _
  $region9: #{convnet_forward.2} parent=0 // pred_fallthru
    _
  // Predicated region
  $region10: #{convnet_forward.2} parent=0 // pred_check
    _
  $region11: #{convnet_forward.2} parent=0 // pred_check_branch
    %15 = sbr.rel (0) target = $region13
  $region12: #{convnet_forward.2} parent=0 // pred_region
    _
  $region13: #{convnet_forward.2} parent=0 // pred_fallthru
    _
  // Predicated region
  $region14: #{convnet_forward.2} parent=0 // pred_check
    _
  $region15: #{convnet_forward.2} parent=0 // pred_check_branch
    %17 = sbr.rel (0) target = $region17
  $region16: #{convnet_forward.2} parent=0 // pred_region
    _
  $region17: #{convnet_forward.2} parent=0 // pred_fallthru
    _
  // Predicated region
  $region18: #{convnet_forward.2} parent=0 // pred_check
    _
  $region19: #{convnet_forward.2} parent=0 // pred_check_branch
    %19 = sbr.rel (0) target = $region21
  $region20: #{convnet_forward.2} parent=0 // pred_region
    _
  $region21: #{convnet_forward.2} parent=0 // pred_fallthru
    _
  %v21 = vld [vmem:[%s0] sm:$0xf]
  %v22 = vld [vmem:[%s0 + $0x4] sm:$0xf]
  %v23 = vld [vmem:[%s0 + $0x8] sm:$0xf]
  %v24 = vld [vmem:[%s0 + $0xc] sm:$0xf]
  %v25 = vld [vmem:[%s0 + $0x10] sm:$0xf]
  %v26 = vld [vmem:[%s0 + $0x14] sm:$0xf]
  %v27 = vld [vmem:[%s0 + $0x18] sm:$0xf]
  %v28 = vld [vmem:[%s0 + $0x1c] sm:$0xf]
  %v29 = vld [vmem:[%s0 + $0x20] sm:$0xf]
  %v30 = vld [vmem:[%s0 + $0x24] sm:$0xf]
  %v31 = vld [vmem:[%s0 + $0x28] sm:$0xf]
  %v32 = vld [vmem:[%s0 + $0x2c] sm:$0xf]
  %v33 = vld [vmem:[%s0 + $0x30] sm:$0xf]
  %v34 = vld [vmem:[%s0 + $0x34] sm:$0xf]
  %v35 = vld [vmem:[%s0 + $0x38] sm:$0xf]
  %v36 = vld [vmem:[%s0 + $0x3c] sm:$0xf]
  %v37 = vld [vmem:[%s0 + $0x40] sm:$0xf]
  %v38 = vld [vmem:[%s0 + $0x44] sm:$0xf]
  %v39 = vld [vmem:[%s0 + $0x48] sm:$0xf]
  %v40 = vld [vmem:[%s0 + $0x4c] sm:$0xf]
  %v41 = vld [vmem:[%s0 + $0x50] sm:$0xf]
  %v42 = vld [vmem:[%s0 + $0x54] sm:$0xf]
  %v43 = vld [vmem:[%s0 + $0x58] sm:$0xf]
  %v44 = vld [vmem:[%s0 + $0x5c] sm:$0xf]
  %v45 = vld [vmem:[%s0 + $0x60] sm:$0xf]
  %v46 = vld [vmem:[%s0 + $0x64] sm:$0xf]
  %v47 = vld [vmem:[%s0 + $0x68] sm:$0xf]
  %v48 = vld [vmem:[%s0 + $0x6c] sm:$0xf]
  %v49 = vld [vmem:[%s0 + $0x70] sm:$0xf]
  %v50 = vld [vmem:[%s0 + $0x74] sm:$0xf]
  %v51 = vld [vmem:[%s0 + $0x78] sm:$0xf]
  %v52 = vld [vmem:[%s0 + $0x7c] sm:$0xf]
  %v53 = vld [vmem:[%s0 + $0x80] sm:$0xf]
  %v54 = vld [vmem:[%s0 + $0x84] sm:$0xf]
  %v55 = vld [vmem:[%s0 + $0x88] sm:$0xf]
  %v56 = vld [vmem:[%s0 + $0x8c] sm:$0xf]
  %v57 = vld [vmem:[%s0 + $0x90] sm:$0xf]
  %v58 = vld [vmem:[%s0 + $0x94] sm:$0xf]
  %v59 = vld [vmem:[%s0 + $0x98] sm:$0xf]
  %v60 = vld [vmem:[%s0 + $0x9c] sm:$0xf]
  %v61 = vld [vmem:[%s0 + $0xa0] sm:$0xf]
  %v62 = vld [vmem:[%s0 + $0xa4] sm:$0xf]
  %v63 = vld [vmem:[%s0 + $0xa8] sm:$0xf]
  %v64 = vld [vmem:[%s0 + $0xac] sm:$0xf]
  %v65 = vld [vmem:[%s0 + $0xb0] sm:$0xf]
  %v66 = vld [vmem:[%s0 + $0xb4] sm:$0xf]
  %v67 = vld [vmem:[%s0 + $0xb8] sm:$0xf]
  %v68 = vld [vmem:[%s0 + $0xbc] sm:$0xf]
  %v69 = vld [vmem:[%s0 + $0xc0] sm:$0xf]
  %v70 = vld [vmem:[%s0 + $0xc4] sm:$0xf]
  %v71 = vld [vmem:[%s0 + $0xc8] sm:$0xf]
  %v72 = vld [vmem:[%s0 + $0xcc] sm:$0xf]
  %v73 = vld [vmem:[%s0 + $0xd0] sm:$0xf]
  %v74 = vld [vmem:[%s0 + $0xd4] sm:$0xf]
  %v75 = vld [vmem:[%s0 + $0xd8] sm:$0xf]
  %v76 = vld [vmem:[%s0 + $0xdc] sm:$0xf]
  %v77 = vld [vmem:[%s0 + $0xe0] sm:$0xf]
  %v78 = vld [vmem:[%s0 + $0xe4] sm:$0xf]
  %v79 = vld [vmem:[%s0 + $0xe8] sm:$0xf]
  %v80 = vld [vmem:[%s0 + $0xec] sm:$0xf]
  %v81 = vld [vmem:[%s0 + $0xf0] sm:$0xf]
  %v82 = vld [vmem:[%s0 + $0xf4] sm:$0xf]
  %v83 = vld [vmem:[%s0 + $0xf8] sm:$0xf]
  %v84 = vld [vmem:[%s0 + $0xfc] sm:$0xf]
  %v85 = vld [vmem:[%s0 + $0x100] sm:$0xf]
  %v86 = vld [vmem:[%s0 + $0x104] sm:$0xf]
  %v87 = vld [vmem:[%s0 + $0x108] sm:$0xf]
  %v88 = vld [vmem:[%s0 + $0x10c] sm:$0xf]
  %v89 = vld [vmem:[%s0 + $0x110] sm:$0xf]
  %v90 = vld [vmem:[%s0 + $0x114] sm:$0xf]
  %v91 = vld [vmem:[%s0 + $0x118] sm:$0xf]
  %v92 = vld [vmem:[%s0 + $0x11c] sm:$0xf]
  %v93 = vld [vmem:[%s0 + $0x120] sm:$0xf]
  %v94 = vld [vmem:[%s0 + $0x124] sm:$0xf]
  %v95 = vld [vmem:[%s0 + $0x128] sm:$0xf]
  %v96 = vld [vmem:[%s0 + $0x12c] sm:$0xf]
  %v97 = vld [vmem:[%s0 + $0x130] sm:$0xf]
  %v98 = vld [vmem:[%s0 + $0x134] sm:$0xf]
  %v99 = vld [vmem:[%s0 + $0x138] sm:$0xf]
  %v100 = vld [vmem:[%s0 + $0x13c] sm:$0xf]
  %v101 = vld [vmem:[%s0 + $0x140] sm:$0xf]
  %v102 = vld [vmem:[%s0 + $0x144] sm:$0xf]
  %v103 = vld [vmem:[%s0 + $0x148] sm:$0xf]
  %v104 = vld [vmem:[%s0 + $0x14c] sm:$0xf]
  %v105 = vld [vmem:[%s0 + $0x150] sm:$0xf]
  %v106 = vld [vmem:[%s0 + $0x154] sm:$0xf]
  %v107 = vld [vmem:[%s0 + $0x158] sm:$0xf]
  %v108 = vld [vmem:[%s0 + $0x15c] sm:$0xf]
  %v109 = vld [vmem:[%s0 + $0x160] sm:$0xf]
  %v110 = vld [vmem:[%s0 + $0x164] sm:$0xf]
  %v111 = vld [vmem:[%s0 + $0x168] sm:$0xf]
  %v112 = vld [vmem:[%s0 + $0x16c] sm:$0xf]
  %v113 = vld [vmem:[%s0 + $0x170] sm:$0xf]
  %v114 = vld [vmem:[%s0 + $0x174] sm:$0xf]
  %v115 = vld [vmem:[%s0 + $0x178] sm:$0xf]
  %v116 = vld [vmem:[%s0 + $0x17c] sm:$0xf]
  %v117 = vld [vmem:[%s0 + $0x180] sm:$0xf]
  %v118 = vld [vmem:[%s0 + $0x184] sm:$0xf]
  %v119 = vld [vmem:[%s0 + $0x188] sm:$0xf]
  %v120 = vld [vmem:[%s0 + $0x18c] sm:$0xf]
  %v121 = vld [vmem:[%s0 + $0x190] sm:$0xf]
  %v122 = vld [vmem:[%s0 + $0x194] sm:$0xf]
  %v123 = vld [vmem:[%s0 + $0x198] sm:$0xf]
  %v124 = vld [vmem:[%s0 + $0x19c] sm:$0xf]
  %v125 = vld [vmem:[%s0 + $0x1a0] sm:$0xf]
  %v126 = vld [vmem:[%s0 + $0x1a4] sm:$0xf]
  %v127 = vld [vmem:[%s0 + $0x1a8] sm:$0xf]
  %v128 = vld [vmem:[%s0 + $0x1ac] sm:$0xf]
  %v129 = vld [vmem:[%s0 + $0x1b0] sm:$0xf]
  %v130 = vld [vmem:[%s0 + $0x1b4] sm:$0xf]
  %v131 = vld [vmem:[%s0 + $0x1b8] sm:$0xf]
  %v132 = vld [vmem:[%s0 + $0x1bc] sm:$0xf]
  %v133 = vld [vmem:[%s0 + $0x1c0] sm:$0xf]
  %v134 = vld [vmem:[%s0 + $0x1c4] sm:$0xf]
  %v135 = vld [vmem:[%s0 + $0x1c8] sm:$0xf]
  %v136 = vld [vmem:[%s0 + $0x1cc] sm:$0xf]
  %v137 = vld [vmem:[%s0 + $0x1d0] sm:$0xf]
  %v138 = vld [vmem:[%s0 + $0x1d4] sm:$0xf]
  %v139 = vld [vmem:[%s0 + $0x1d8] sm:$0xf]
  %v140 = vld [vmem:[%s0 + $0x1dc] sm:$0xf]
  %v141 = vld [vmem:[%s0 + $0x1e0] sm:$0xf]
  %v142 = vld [vmem:[%s0 + $0x1e4] sm:$0xf]
  %v143 = vld [vmem:[%s0 + $0x1e8] sm:$0xf]
  %v144 = vld [vmem:[%s0 + $0x1ec] sm:$0xf]
  %v145 = vld [vmem:[%s0 + $0x1f0] sm:$0xf]
  %v146 = vld [vmem:[%s0 + $0x1f4] sm:$0xf]
  %v147 = vld [vmem:[%s0 + $0x1f8] sm:$0xf]
  %v148 = vld [vmem:[%s0 + $0x1fc] sm:$0xf]
  %v149 = vld [vmem:[%s0 + $0x200] sm:$0xf]
  %v150 = vld [vmem:[%s0 + $0x204] sm:$0xf]
  %v151 = vld [vmem:[%s0 + $0x208] sm:$0xf]
  %v152 = vld [vmem:[%s0 + $0x20c] sm:$0xf]
  %v153 = vld [vmem:[%s0 + $0x210] sm:$0xf]
  %v154 = vld [vmem:[%s0 + $0x214] sm:$0xf]
  %v155 = vld [vmem:[%s0 + $0x218] sm:$0xf]
  %v156 = vld [vmem:[%s0 + $0x21c] sm:$0xf]
  %v157 = vld [vmem:[%s0 + $0x220] sm:$0xf]
  %v158 = vld [vmem:[%s0 + $0x224] sm:$0xf]
  %v159 = vld [vmem:[%s0 + $0x228] sm:$0xf]
  %v160 = vld [vmem:[%s0 + $0x22c] sm:$0xf]
  %v161 = vld [vmem:[%s0 + $0x230] sm:$0xf]
  %v162 = vld [vmem:[%s0 + $0x234] sm:$0xf]
  %v163 = vld [vmem:[%s0 + $0x238] sm:$0xf]
  %v164 = vld [vmem:[%s0 + $0x23c] sm:$0xf]
  %v165 = vld [vmem:[%s0 + $0x240] sm:$0xf]
  %v166 = vld [vmem:[%s0 + $0x244] sm:$0xf]
  %v167 = vld [vmem:[%s0 + $0x248] sm:$0xf]
  %v168 = vld [vmem:[%s0 + $0x24c] sm:$0xf]
  %v169 = vld [vmem:[%s0 + $0x250] sm:$0xf]
  %v170 = vld [vmem:[%s0 + $0x254] sm:$0xf]
  %v171 = vld [vmem:[%s0 + $0x258] sm:$0xf]
  %v172 = vld [vmem:[%s0 + $0x25c] sm:$0xf]
  %v173 = vld [vmem:[%s0 + $0x260] sm:$0xf]
  %v174 = vld [vmem:[%s0 + $0x264] sm:$0xf]
  %v175 = vld [vmem:[%s0 + $0x268] sm:$0xf]
  %v176 = vld [vmem:[%s0 + $0x26c] sm:$0xf]
  %v177 = vld [vmem:[%s0 + $0x270] sm:$0xf]
  %v178 = vld [vmem:[%s0 + $0x274] sm:$0xf]
  %v179 = vld [vmem:[%s0 + $0x278] sm:$0xf]
  %v180 = vld [vmem:[%s0 + $0x27c] sm:$0xf]
  %v181 = vld [vmem:[%s0 + $0x280] sm:$0xf]
  %v182 = vld [vmem:[%s0 + $0x284] sm:$0xf]
  %v183 = vld [vmem:[%s0 + $0x288] sm:$0xf]
  %v184 = vld [vmem:[%s0 + $0x28c] sm:$0xf]
  %v185 = vld [vmem:[%s0 + $0x290] sm:$0xf]
  %v186 = vld [vmem:[%s0 + $0x294] sm:$0xf]
  %v187 = vld [vmem:[%s0 + $0x298] sm:$0xf]
  %v188 = vld [vmem:[%s0 + $0x29c] sm:$0xf]
  %v189 = vld [vmem:[%s0 + $0x2a0] sm:$0xf]
  %v190 = vld [vmem:[%s0 + $0x2a4] sm:$0xf]
  %v191 = vld [vmem:[%s0 + $0x2a8] sm:$0xf]
  %v192 = vld [vmem:[%s0 + $0x2ac] sm:$0xf]
  %v193 = vld [vmem:[%s0 + $0x2b0] sm:$0xf]
  %v194 = vld [vmem:[%s0 + $0x2b4] sm:$0xf]
  %v195 = vld [vmem:[%s0 + $0x2b8] sm:$0xf]
  %v196 = vld [vmem:[%s0 + $0x2bc] sm:$0xf]
  %v197 = vld [vmem:[%s0 + $0x2c0] sm:$0xf]
  %v198 = vld [vmem:[%s0 + $0x2c4] sm:$0xf]
  %v199 = vld [vmem:[%s0 + $0x2c8] sm:$0xf]
  %v200 = vld [vmem:[%s0 + $0x2cc] sm:$0xf]
  %v201 = vld [vmem:[%s0 + $0x2d0] sm:$0xf]
  %v202 = vld [vmem:[%s0 + $0x2d4] sm:$0xf]
  %v203 = vld [vmem:[%s0 + $0x2d8] sm:$0xf]
  %v204 = vld [vmem:[%s0 + $0x2dc] sm:$0xf]
  %v205 = vld [vmem:[%s0 + $0x2e0] sm:$0xf]
  %v206 = vld [vmem:[%s0 + $0x2e4] sm:$0xf]
  %v207 = vld [vmem:[%s0 + $0x2e8] sm:$0xf]
  %v208 = vld [vmem:[%s0 + $0x2ec] sm:$0xf]
  %v209 = vld [vmem:[%s0 + $0x2f0] sm:$0xf]
  %v210 = vld [vmem:[%s0 + $0x2f4] sm:$0xf]
  %v211 = vld [vmem:[%s0 + $0x2f8] sm:$0xf]
  %v212 = vld [vmem:[%s0 + $0x2fc] sm:$0xf]
  %v213 = vld [vmem:[%s0 + $0x300] sm:$0xf]
  %v214 = vld [vmem:[%s0 + $0x304] sm:$0xf]
  %v215 = vld [vmem:[%s0 + $0x308] sm:$0xf]
  %v216 = vld [vmem:[%s0 + $0x30c] sm:$0xf]
  %v217 = vld [vmem:[%s0 + $0x310] sm:$0xf]
  %v218 = vld [vmem:[%s0 + $0x314] sm:$0xf]
  %v219 = vld [vmem:[%s0 + $0x318] sm:$0xf]
  %v220 = vld [vmem:[%s0 + $0x31c] sm:$0xf]
  %v221 = vld [vmem:[%s0 + $0x320] sm:$0xf]
  %v222 = vld [vmem:[%s0 + $0x324] sm:$0xf]
  %v223 = vld [vmem:[%s0 + $0x328] sm:$0xf]
  %v224 = vld [vmem:[%s0 + $0x32c] sm:$0xf]
  %v225 = vld [vmem:[%s0 + $0x330] sm:$0xf]
  %v226 = vld [vmem:[%s0 + $0x334] sm:$0xf]
  %v227 = vld [vmem:[%s0 + $0x338] sm:$0xf]
  %v228 = vld [vmem:[%s0 + $0x33c] sm:$0xf]
  %v229 = vld [vmem:[%s0 + $0x340] sm:$0xf]
  %v230 = vld [vmem:[%s0 + $0x344] sm:$0xf]
  %v231 = vld [vmem:[%s0 + $0x348] sm:$0xf]
  %v232 = vld [vmem:[%s0 + $0x34c] sm:$0xf]
  %v233 = vld [vmem:[%s0 + $0x350] sm:$0xf]
  %v234 = vld [vmem:[%s0 + $0x354] sm:$0xf]
  %v235 = vld [vmem:[%s0 + $0x358] sm:$0xf]
  %v236 = vld [vmem:[%s0 + $0x35c] sm:$0xf]
  %v237 = vld [vmem:[%s0 + $0x360] sm:$0xf]
  %v238 = vld [vmem:[%s0 + $0x364] sm:$0xf]
  %v239 = vld [vmem:[%s0 + $0x368] sm:$0xf]
  %v240 = vld [vmem:[%s0 + $0x36c] sm:$0xf]
  %v241 = vld [vmem:[%s0 + $0x370] sm:$0xf]
  %v242 = vld [vmem:[%s0 + $0x374] sm:$0xf]
  %v243 = vld [vmem:[%s0 + $0x378] sm:$0xf]
  %v244 = vld [vmem:[%s0 + $0x37c] sm:$0xf]
  %v245 = vld [vmem:[%s1] sm:$0xf]
  %v246 = vld [vmem:[%s1 + $0x4] sm:$0xf]
  %v247 = vld [vmem:[%s1 + $0x8] sm:$0xf]
  %v248 = vld [vmem:[%s1 + $0xc] sm:$0xf]
  %v249 = vld [vmem:[%s1 + $0x10] sm:$0xf]
  %v250 = vld [vmem:[%s1 + $0x14] sm:$0xf]
  %v251 = vld [vmem:[%s1 + $0x18] sm:$0xf]
  %v252 = vld [vmem:[%s1 + $0x1c] sm:$0xf]
  %v253 = vld [vmem:[%s1 + $0x20] sm:$0xf]
  %v254 = vld [vmem:[%s1 + $0x24] sm:$0xf]
  %v255 = vld [vmem:[%s1 + $0x28] sm:$0xf]
  %v256 = vld [vmem:[%s1 + $0x2c] sm:$0xf]
  %v257 = vld [vmem:[%s1 + $0x30] sm:$0xf]
  %v258 = vld [vmem:[%s1 + $0x34] sm:$0xf]
  %v259 = vld [vmem:[%s1 + $0x38] sm:$0xf]
  %v260 = vld [vmem:[%s1 + $0x3c] sm:$0xf]
  %v261 = vld [vmem:[%s2] sm:$0x1]
  %v263 = vlaneseq
  %v264 = vshrl.u32 %v263, 7
  %v265 = vsub.s32 0, %v264
  %v266 = vrot.slane %v261, %v265
  %v492 = vunpack.c.l.b16 %v21
  %v493 = vunpack.c.l.b16 %v22
  %v494 = vunpack.c.l.b16 %v23
  %v495 = vunpack.c.l.b16 %v24
  %v496 = vunpack.c.l.b16 %v25
  %v497 = vunpack.c.l.b16 %v26
  %v498 = vunpack.c.l.b16 %v27
  %v499 = vunpack.c.l.b16 %v28
  %v500 = vunpack.c.l.b16 %v29
  %v501 = vunpack.c.l.b16 %v30
  %v502 = vunpack.c.l.b16 %v31
  %v503 = vunpack.c.l.b16 %v32
  %v504 = vunpack.c.l.b16 %v33
  %v505 = vunpack.c.l.b16 %v34
  %v506 = vunpack.c.l.b16 %v35
  %v507 = vunpack.c.l.b16 %v36
  %v508 = vunpack.c.l.b16 %v37
  %v509 = vunpack.c.l.b16 %v38
  %v510 = vunpack.c.l.b16 %v39
  %v511 = vunpack.c.l.b16 %v40
  %v512 = vunpack.c.l.b16 %v41
  %v513 = vunpack.c.l.b16 %v42
  %v514 = vunpack.c.l.b16 %v43
  %v515 = vunpack.c.l.b16 %v44
  %v516 = vunpack.c.l.b16 %v45
  %v517 = vunpack.c.l.b16 %v46
  %v518 = vunpack.c.l.b16 %v47
  %v519 = vunpack.c.l.b16 %v48
  %v520 = vunpack.c.l.b16 %v49
  %v521 = vunpack.c.l.b16 %v50
  %v522 = vunpack.c.l.b16 %v51
  %v523 = vunpack.c.l.b16 %v52
  %v524 = vunpack.c.l.b16 %v53
  %v525 = vunpack.c.l.b16 %v54
  %v526 = vunpack.c.l.b16 %v55
  %v527 = vunpack.c.l.b16 %v56
  %v528 = vunpack.c.l.b16 %v57
  %v529 = vunpack.c.l.b16 %v58
  %v530 = vunpack.c.l.b16 %v59
  %v531 = vunpack.c.l.b16 %v60
  %v532 = vunpack.c.l.b16 %v61
  %v533 = vunpack.c.l.b16 %v62
  %v534 = vunpack.c.l.b16 %v63
  %v535 = vunpack.c.l.b16 %v64
  %v536 = vunpack.c.l.b16 %v65
  %v537 = vunpack.c.l.b16 %v66
  %v538 = vunpack.c.l.b16 %v67
  %v539 = vunpack.c.l.b16 %v68
  %v540 = vunpack.c.l.b16 %v69
  %v541 = vunpack.c.l.b16 %v70
  %v542 = vunpack.c.l.b16 %v71
  %v543 = vunpack.c.l.b16 %v72
  %v544 = vunpack.c.l.b16 %v73
  %v545 = vunpack.c.l.b16 %v74
  %v546 = vunpack.c.l.b16 %v75
  %v547 = vunpack.c.l.b16 %v76
  %v548 = vunpack.c.l.b16 %v77
  %v549 = vunpack.c.l.b16 %v78
  %v550 = vunpack.c.l.b16 %v79
  %v551 = vunpack.c.l.b16 %v80
  %v552 = vunpack.c.l.b16 %v81
  %v553 = vunpack.c.l.b16 %v82
  %v554 = vunpack.c.l.b16 %v83
  %v555 = vunpack.c.l.b16 %v84
  %v556 = vunpack.c.l.b16 %v85
  %v557 = vunpack.c.l.b16 %v86
  %v558 = vunpack.c.l.b16 %v87
  %v559 = vunpack.c.l.b16 %v88
  %v560 = vunpack.c.l.b16 %v89
  %v561 = vunpack.c.l.b16 %v90
  %v562 = vunpack.c.l.b16 %v91
  %v563 = vunpack.c.l.b16 %v92
  %v564 = vunpack.c.l.b16 %v93
  %v565 = vunpack.c.l.b16 %v94
  %v566 = vunpack.c.l.b16 %v95
  %v567 = vunpack.c.l.b16 %v96
  %v568 = vunpack.c.l.b16 %v97
  %v569 = vunpack.c.l.b16 %v98
  %v570 = vunpack.c.l.b16 %v99
  %v571 = vunpack.c.l.b16 %v100
  %v572 = vunpack.c.l.b16 %v101
  %v573 = vunpack.c.l.b16 %v102
  %v574 = vunpack.c.l.b16 %v103
  %v575 = vunpack.c.l.b16 %v104
  %v576 = vunpack.c.l.b16 %v105
  %v577 = vunpack.c.l.b16 %v106
  %v578 = vunpack.c.l.b16 %v107
  %v579 = vunpack.c.l.b16 %v108
  %v580 = vunpack.c.l.b16 %v109
  %v581 = vunpack.c.l.b16 %v110
  %v582 = vunpack.c.l.b16 %v111
  %v583 = vunpack.c.l.b16 %v112
  %v584 = vunpack.c.l.b16 %v113
  %v585 = vunpack.c.l.b16 %v114
  %v586 = vunpack.c.l.b16 %v115
  %v587 = vunpack.c.l.b16 %v116
  %v588 = vunpack.c.l.b16 %v117
  %v589 = vunpack.c.l.b16 %v118
  %v590 = vunpack.c.l.b16 %v119
  %v591 = vunpack.c.l.b16 %v120
  %v592 = vunpack.c.l.b16 %v121
  %v593 = vunpack.c.l.b16 %v122
  %v594 = vunpack.c.l.b16 %v123
  %v595 = vunpack.c.l.b16 %v124
  %v596 = vunpack.c.l.b16 %v125
  %v597 = vunpack.c.l.b16 %v126
  %v598 = vunpack.c.l.b16 %v127
  %v599 = vunpack.c.l.b16 %v128
  %v600 = vunpack.c.l.b16 %v129
  %v601 = vunpack.c.l.b16 %v130
  %v602 = vunpack.c.l.b16 %v131
  %v603 = vunpack.c.l.b16 %v132
  %v604 = vunpack.c.l.b16 %v133
  %v605 = vunpack.c.l.b16 %v134
  %v606 = vunpack.c.l.b16 %v135
  %v607 = vunpack.c.l.b16 %v136
  %v608 = vunpack.c.l.b16 %v137
  %v609 = vunpack.c.l.b16 %v138
  %v610 = vunpack.c.l.b16 %v139
  %v611 = vunpack.c.l.b16 %v140
  %v612 = vunpack.c.l.b16 %v141
  %v613 = vunpack.c.l.b16 %v142
  %v614 = vunpack.c.l.b16 %v143
  %v615 = vunpack.c.l.b16 %v144
  %v616 = vunpack.c.l.b16 %v145
  %v617 = vunpack.c.l.b16 %v146
  %v618 = vunpack.c.l.b16 %v147
  %v619 = vunpack.c.l.b16 %v148
  %v620 = vunpack.c.l.b16 %v149
  %v621 = vunpack.c.l.b16 %v150
  %v622 = vunpack.c.l.b16 %v151
  %v623 = vunpack.c.l.b16 %v152
  %v624 = vunpack.c.l.b16 %v153
  %v625 = vunpack.c.l.b16 %v154
  %v626 = vunpack.c.l.b16 %v155
  %v627 = vunpack.c.l.b16 %v156
  %v628 = vunpack.c.l.b16 %v157
  %v629 = vunpack.c.l.b16 %v158
  %v630 = vunpack.c.l.b16 %v159
  %v631 = vunpack.c.l.b16 %v160
  %v632 = vunpack.c.l.b16 %v161
  %v633 = vunpack.c.l.b16 %v162
  %v634 = vunpack.c.l.b16 %v163
  %v635 = vunpack.c.l.b16 %v164
  %v636 = vunpack.c.l.b16 %v165
  %v637 = vunpack.c.l.b16 %v166
  %v638 = vunpack.c.l.b16 %v167
  %v639 = vunpack.c.l.b16 %v168
  %v640 = vunpack.c.l.b16 %v169
  %v641 = vunpack.c.l.b16 %v170
  %v642 = vunpack.c.l.b16 %v171
  %v643 = vunpack.c.l.b16 %v172
  %v644 = vunpack.c.l.b16 %v173
  %v645 = vunpack.c.l.b16 %v174
  %v646 = vunpack.c.l.b16 %v175
  %v647 = vunpack.c.l.b16 %v176
  %v648 = vunpack.c.l.b16 %v177
  %v649 = vunpack.c.l.b16 %v178
  %v650 = vunpack.c.l.b16 %v179
  %v651 = vunpack.c.l.b16 %v180
  %v652 = vunpack.c.l.b16 %v181
  %v653 = vunpack.c.l.b16 %v182
  %v654 = vunpack.c.l.b16 %v183
  %v655 = vunpack.c.l.b16 %v184
  %v656 = vunpack.c.l.b16 %v185
  %v657 = vunpack.c.l.b16 %v186
  %v658 = vunpack.c.l.b16 %v187
  %v659 = vunpack.c.l.b16 %v188
  %v660 = vunpack.c.l.b16 %v189
  %v661 = vunpack.c.l.b16 %v190
  %v662 = vunpack.c.l.b16 %v191
  %v663 = vunpack.c.l.b16 %v192
  %v664 = vunpack.c.l.b16 %v193
  %v665 = vunpack.c.l.b16 %v194
  %v666 = vunpack.c.l.b16 %v195
  %v667 = vunpack.c.l.b16 %v196
  %v668 = vunpack.c.l.b16 %v197
  %v669 = vunpack.c.l.b16 %v198
  %v670 = vunpack.c.l.b16 %v199
  %v671 = vunpack.c.l.b16 %v200
  %v672 = vunpack.c.l.b16 %v201
  %v673 = vunpack.c.l.b16 %v202
  %v674 = vunpack.c.l.b16 %v203
  %v675 = vunpack.c.l.b16 %v204
  %v676 = vunpack.c.l.b16 %v205
  %v677 = vunpack.c.l.b16 %v206
  %v678 = vunpack.c.l.b16 %v207
  %v679 = vunpack.c.l.b16 %v208
  %v680 = vunpack.c.l.b16 %v209
  %v681 = vunpack.c.l.b16 %v210
  %v682 = vunpack.c.l.b16 %v211
  %v683 = vunpack.c.l.b16 %v212
  %v684 = vunpack.c.l.b16 %v213
  %v685 = vunpack.c.l.b16 %v214
  %v686 = vunpack.c.l.b16 %v215
  %v687 = vunpack.c.l.b16 %v216
  %v688 = vunpack.c.l.b16 %v217
  %v689 = vunpack.c.l.b16 %v218
  %v690 = vunpack.c.l.b16 %v219
  %v691 = vunpack.c.l.b16 %v220
  %v692 = vunpack.c.l.b16 %v221
  %v693 = vunpack.c.l.b16 %v222
  %v694 = vunpack.c.l.b16 %v223
  %v695 = vunpack.c.l.b16 %v224
  %v696 = vunpack.c.l.b16 %v225
  %v697 = vunpack.c.l.b16 %v226
  %v698 = vunpack.c.l.b16 %v227
  %v699 = vunpack.c.l.b16 %v228
  %v700 = vunpack.c.l.b16 %v229
  %v701 = vunpack.c.l.b16 %v230
  %v702 = vunpack.c.l.b16 %v231
  %v703 = vunpack.c.l.b16 %v232
  %v704 = vunpack.c.l.b16 %v233
  %v705 = vunpack.c.l.b16 %v234
  %v706 = vunpack.c.l.b16 %v235
  %v707 = vunpack.c.l.b16 %v236
  %v708 = vunpack.c.l.b16 %v237
  %v709 = vunpack.c.l.b16 %v238
  %v710 = vunpack.c.l.b16 %v239
  %v711 = vunpack.c.l.b16 %v240
  %v712 = vunpack.c.l.b16 %v241
  %v713 = vunpack.c.l.b16 %v242
  %v714 = vunpack.c.l.b16 %v243
  %v715 = vunpack.c.l.b16 %v244
  %v716 = vpack.c.b16 %v493, %v492
  %v717 = vpack.c.b16 %v495, %v494
  %v718 = vpack.c.b16 %v497, %v496
  %v719 = vpack.c.b16 %v499, %v498
  %v720 = vpack.c.b16 %v501, %v500
  %v721 = vpack.c.b16 %v503, %v502
  %v722 = vpack.c.b16 %v505, %v504
  %v723 = vpack.c.b16 %v507, %v506
  %v724 = vpack.c.b16 %v509, %v508
  %v725 = vpack.c.b16 %v511, %v510
  %v726 = vpack.c.b16 %v513, %v512
  %v727 = vpack.c.b16 %v515, %v514
  %v728 = vpack.c.b16 %v517, %v516
  %v729 = vpack.c.b16 %v519, %v518
  %v730 = vpack.c.b16 %v521, %v520
  %v731 = vpack.c.b16 %v523, %v522
  %v732 = vpack.c.b16 %v525, %v524
  %v733 = vpack.c.b16 %v527, %v526
  %v734 = vpack.c.b16 %v529, %v528
  %v735 = vpack.c.b16 %v531, %v530
  %v736 = vpack.c.b16 %v533, %v532
  %v737 = vpack.c.b16 %v535, %v534
  %v738 = vpack.c.b16 %v537, %v536
  %v739 = vpack.c.b16 %v539, %v538
  %v740 = vpack.c.b16 %v541, %v540
  %v741 = vpack.c.b16 %v543, %v542
  %v742 = vpack.c.b16 %v545, %v544
  %v743 = vpack.c.b16 %v547, %v546
  %v744 = vpack.c.b16 %v549, %v548
  %v745 = vpack.c.b16 %v551, %v550
  %v746 = vpack.c.b16 %v553, %v552
  %v747 = vpack.c.b16 %v555, %v554
  %v748 = vpack.c.b16 %v557, %v556
  %v749 = vpack.c.b16 %v559, %v558
  %v750 = vpack.c.b16 %v561, %v560
  %v751 = vpack.c.b16 %v563, %v562
  %v752 = vpack.c.b16 %v565, %v564
  %v753 = vpack.c.b16 %v567, %v566
  %v754 = vpack.c.b16 %v569, %v568
  %v755 = vpack.c.b16 %v571, %v570
  %v756 = vpack.c.b16 %v573, %v572
  %v757 = vpack.c.b16 %v575, %v574
  %v758 = vpack.c.b16 %v577, %v576
  %v759 = vpack.c.b16 %v579, %v578
  %v760 = vpack.c.b16 %v581, %v580
  %v761 = vpack.c.b16 %v583, %v582
  %v762 = vpack.c.b16 %v585, %v584
  %v763 = vpack.c.b16 %v587, %v586
  %v764 = vpack.c.b16 %v589, %v588
  %v765 = vpack.c.b16 %v591, %v590
  %v766 = vpack.c.b16 %v593, %v592
  %v767 = vpack.c.b16 %v595, %v594
  %v768 = vpack.c.b16 %v597, %v596
  %v769 = vpack.c.b16 %v599, %v598
  %v770 = vpack.c.b16 %v601, %v600
  %v771 = vpack.c.b16 %v603, %v602
  %v772 = vpack.c.b16 %v605, %v604
  %v773 = vpack.c.b16 %v607, %v606
  %v774 = vpack.c.b16 %v609, %v608
  %v775 = vpack.c.b16 %v611, %v610
  %v776 = vpack.c.b16 %v613, %v612
  %v777 = vpack.c.b16 %v615, %v614
  %v778 = vpack.c.b16 %v617, %v616
  %v779 = vpack.c.b16 %v619, %v618
  %v780 = vpack.c.b16 %v621, %v620
  %v781 = vpack.c.b16 %v623, %v622
  %v782 = vpack.c.b16 %v625, %v624
  %v783 = vpack.c.b16 %v627, %v626
  %v784 = vpack.c.b16 %v629, %v628
  %v785 = vpack.c.b16 %v631, %v630
  %v786 = vpack.c.b16 %v633, %v632
  %v787 = vpack.c.b16 %v635, %v634
  %v788 = vpack.c.b16 %v637, %v636
  %v789 = vpack.c.b16 %v639, %v638
  %v790 = vpack.c.b16 %v641, %v640
  %v791 = vpack.c.b16 %v643, %v642
  %v792 = vpack.c.b16 %v645, %v644
  %v793 = vpack.c.b16 %v647, %v646
  %v794 = vpack.c.b16 %v649, %v648
  %v795 = vpack.c.b16 %v651, %v650
  %v796 = vpack.c.b16 %v653, %v652
  %v797 = vpack.c.b16 %v655, %v654
  %v798 = vpack.c.b16 %v657, %v656
  %v799 = vpack.c.b16 %v659, %v658
  %v800 = vpack.c.b16 %v661, %v660
  %v801 = vpack.c.b16 %v663, %v662
  %v802 = vpack.c.b16 %v665, %v664
  %v803 = vpack.c.b16 %v667, %v666
  %v804 = vpack.c.b16 %v669, %v668
  %v805 = vpack.c.b16 %v671, %v670
  %v806 = vpack.c.b16 %v673, %v672
  %v807 = vpack.c.b16 %v675, %v674
  %v808 = vpack.c.b16 %v677, %v676
  %v809 = vpack.c.b16 %v679, %v678
  %v810 = vpack.c.b16 %v681, %v680
  %v811 = vpack.c.b16 %v683, %v682
  %v812 = vpack.c.b16 %v685, %v684
  %v813 = vpack.c.b16 %v687, %v686
  %v814 = vpack.c.b16 %v689, %v688
  %v815 = vpack.c.b16 %v691, %v690
  %v816 = vpack.c.b16 %v693, %v692
  %v817 = vpack.c.b16 %v695, %v694
  %v818 = vpack.c.b16 %v697, %v696
  %v819 = vpack.c.b16 %v699, %v698
  %v820 = vpack.c.b16 %v701, %v700
  %v821 = vpack.c.b16 %v703, %v702
  %v822 = vpack.c.b16 %v705, %v704
  %v823 = vpack.c.b16 %v707, %v706
  %v824 = vpack.c.b16 %v709, %v708
  %v825 = vpack.c.b16 %v711, %v710
  %v826 = vpack.c.b16 %v713, %v712
  %v827 = vpack.c.b16 %v715, %v714
  %v956 = vunpack.c.l.b16 %v245
  %v957 = vunpack.c.l.b16 %v246
  %v958 = vunpack.c.l.b16 %v247
  %v959 = vunpack.c.l.b16 %v248
  %v960 = vunpack.c.l.b16 %v249
  %v961 = vunpack.c.l.b16 %v250
  %v962 = vunpack.c.l.b16 %v251
  %v963 = vunpack.c.l.b16 %v252
  %v964 = vunpack.c.l.b16 %v253
  %v965 = vunpack.c.l.b16 %v254
  %v966 = vunpack.c.l.b16 %v255
  %v967 = vunpack.c.l.b16 %v256
  %v968 = vunpack.c.l.b16 %v257
  %v969 = vunpack.c.l.b16 %v258
  %v970 = vunpack.c.l.b16 %v259
  %v971 = vunpack.c.l.b16 %v260
  %v972 = vpack.c.b16 %v957, %v956
  %v973 = vpack.c.b16 %v959, %v958
  %v974 = vpack.c.b16 %v961, %v960
  %v975 = vpack.c.b16 %v963, %v962
  %v976 = vpack.c.b16 %v965, %v964
  %v977 = vpack.c.b16 %v967, %v966
  %v978 = vpack.c.b16 %v969, %v968
  %v979 = vpack.c.b16 %v971, %v970
  %988 = vmatprep.subr.bf16.mxu0 0
  %989 = vmatpush1.bf16.msra.mxu0 %v972
  %990 = vmatprep.subr.bf16.mxu0 0
  %991 = vmatpush1.bf16.msra.mxu0 %v973
  %992 = vmatprep.subr.bf16.mxu0 0
  %993 = vmatpush1.bf16.msra.mxu0 %v974
  %994 = vmatprep.subr.bf16.mxu0 0
  %995 = vmatpush1.bf16.msra.mxu0 %v975
  %996 = vmatprep.subr.bf16.mxu0 0
  %997 = vmatpush1.bf16.msra.mxu0 %v976
  %998 = vmatprep.subr.bf16.mxu0 0
  %999 = vmatpush1.bf16.msra.mxu0 %v977
  %1000 = vmatprep.subr.bf16.mxu0 0
  %1001 = vmatpush1.bf16.msra.mxu0 %v978
  %1002 = vmatprep.subr.bf16.mxu0 0
  %1003 = vmatpush1.bf16.msra.mxu0 %v979
  %1004 = vmatprep.subr.bf16.mxu0 0
  %1005 = vmatpush1.bf16.msra.mxu0 0
  %1006 = vmatprep.subr.bf16.mxu0 0
  %1007 = vmatpush1.bf16.msra.mxu0 0
  %1008 = vmatprep.subr.bf16.mxu0 0
  %1009 = vmatpush1.bf16.msra.mxu0 0
  %1010 = vmatprep.subr.bf16.mxu0 0
  %1011 = vmatpush1.bf16.msra.mxu0 0
  %1012 = vmatprep.subr.bf16.mxu0 0
  %1013 = vmatpush1.bf16.msra.mxu0 0
  %1014 = vmatprep.subr.bf16.mxu0 0
  %1015 = vmatpush1.bf16.msra.mxu0 0
  %1016 = vmatprep.subr.bf16.mxu0 0
  %1017 = vmatpush1.bf16.msra.mxu0 0
  %1018 = vmatprep.subr.bf16.mxu0 0
  %1019 = vmatpush1.bf16.msra.mxu0 0
  %1020 = vmatprep.mubr.bf16.mxu0 0
  %1021 = vmatmul.mubr.bf16.gmra.mrb[0].mxu0 %v716
  %v1022 = vpop.f32.mrb[0].mxu0
  %v1023 = vadd.f32 %v266, %v1022
  %v1024 = vpop.f32.mrb[0].mxu0
  %v1025 = vpop.f32.mrb[0].mxu0
  %v1026 = vadd.f32 %v266, %v1025
  %v1027 = vpop.f32.mrb[0].mxu0
  %1028 = vmatprep.mubr.bf16.mxu0 0
  %1029 = vmatmul.mubr.bf16.gmra.mrb[0].mxu0 %v717
  %v1030 = vpop.f32.mrb[0].mxu0
  %v1031 = vadd.f32 %v266, %v1030
  %v1032 = vpop.f32.mrb[0].mxu0
  %v1033 = vpop.f32.mrb[0].mxu0
  %v1034 = vadd.f32 %v266, %v1033
  %v1035 = vpop.f32.mrb[0].mxu0
  %1036 = vmatprep.mubr.bf16.mxu0 0
  %1037 = vmatmul.mubr.bf16.gmra.mrb[0].mxu0 %v718
  %v1038 = vpop.f32.mrb[0].mxu0
  %v1039 = vadd.f32 %v266, %v1038
  %v1040 = vpop.f32.mrb[0].mxu0
  %v1041 = vpop.f32.mrb[0].mxu0
  %v1042 = vadd.f32 %v266, %v1041
  %v1043 = vpop.f32.mrb[0].mxu0
  %1044 = vmatprep.mubr.bf16.mxu0 0
  %1045 = vmatmul.mubr.bf16.gmra.mrb[0].mxu0 %v719
  %v1046 = vpop.f32.mrb[0].mxu0
  %v1047 = vadd.f32 %v266, %v1046
  %v1048 = vpop.f32.mrb[0].mxu0
  %v1049 = vpop.f32.mrb[0].mxu0
  %v1050 = vadd.f32 %v266, %v1049
  %v1051 = vpop.f32.mrb[0].mxu0
  %1052 = vmatprep.mubr.bf16.mxu0 0
  %1053 = vmatmul.mubr.bf16.gmra.mrb[0].mxu0 %v720
  %v1054 = vpop.f32.mrb[0].mxu0
  %v1055 = vadd.f32 %v266, %v1054
  %v1056 = vpop.f32.mrb[0].mxu0
  %v1057 = vpop.f32.mrb[0].mxu0
  %v1058 = vadd.f32 %v266, %v1057
  %v1059 = vpop.f32.mrb[0].mxu0
  %1060 = vmatprep.mubr.bf16.mxu0 0
  %1061 = vmatmul.mubr.bf16.gmra.mrb[0].mxu0 %v721
  %v1062 = vpop.f32.mrb[0].mxu0
  %v1063 = vadd.f32 %v266, %v1062
  %v1064 = vpop.f32.mrb[0].mxu0
  %v1065 = vpop.f32.mrb[0].mxu0
  %v1066 = vadd.f32 %v266, %v1065
  %v1067 = vpop.f32.mrb[0].mxu0
  %1068 = vmatprep.mubr.bf16.mxu0 0
  %1069 = vmatmul.mubr.bf16.gmra.mrb[0].mxu0 %v722
  %v1070 = vpop.f32.mrb[0].mxu0
  %v1071 = vadd.f32 %v266, %v1070
  %v1072 = vpop.f32.mrb[0].mxu0
  %v1073 = vpop.f32.mrb[0].mxu0
  %v1074 = vadd.f32 %v266, %v1073
  %v1075 = vpop.f32.mrb[0].mxu0
  %1076 = vmatprep.mubr.bf16.mxu0 0
  %1077 = vmatmul.mubr.bf16.gmra.mrb[0].mxu0 %v723
  %v1078 = vpop.f32.mrb[0].mxu0
  %v1079 = vadd.f32 %v266, %v1078
  %v1080 = vpop.f32.mrb[0].mxu0
  %v1081 = vpop.f32.mrb[0].mxu0
  %v1082 = vadd.f32 %v266, %v1081
  %v1083 = vpop.f32.mrb[0].mxu0
  %1084 = vmatprep.mubr.bf16.mxu0 0
  %1085 = vmatmul.mubr.bf16.gmra.mrb[0].mxu0 %v724
  %v1086 = vpop.f32.mrb[0].mxu0
  %v1087 = vadd.f32 %v266, %v1086
  %v1088 = vpop.f32.mrb[0].mxu0
  %v1089 = vpop.f32.mrb[0].mxu0
  %v1090 = vadd.f32 %v266, %v1089
  %v1091 = vpop.f32.mrb[0].mxu0
  %1092 = vmatprep.mubr.bf16.mxu0 0
  %1093 = vmatmul.mubr.bf16.gmra.mrb[0].mxu0 %v725
  %v1094 = vpop.f32.mrb[0].mxu0
  %v1095 = vadd.f32 %v266, %v1094
  %v1096 = vpop.f32.mrb[0].mxu0
  %v1097 = vpop.f32.mrb[0].mxu0
  %v1098 = vadd.f32 %v266, %v1097
  %v1099 = vpop.f32.mrb[0].mxu0
  %1100 = vmatprep.mubr.bf16.mxu0 0
  %1101 = vmatmul.mubr.bf16.gmra.mrb[0].mxu0 %v726
  %v1102 = vpop.f32.mrb[0].mxu0
  %v1103 = vadd.f32 %v266, %v1102
  %v1104 = vpop.f32.mrb[0].mxu0
  %v1105 = vpop.f32.mrb[0].mxu0
  %v1106 = vadd.f32 %v266, %v1105
  %v1107 = vpop.f32.mrb[0].mxu0
  %1108 = vmatprep.mubr.bf16.mxu0 0
  %1109 = vmatmul.mubr.bf16.gmra.mrb[0].mxu0 %v727
  %v1110 = vpop.f32.mrb[0].mxu0
  %v1111 = vadd.f32 %v266, %v1110
  %v1112 = vpop.f32.mrb[0].mxu0
  %v1113 = vpop.f32.mrb[0].mxu0
  %v1114 = vadd.f32 %v266, %v1113
  %v1115 = vpop.f32.mrb[0].mxu0
  %1116 = vmatprep.mubr.bf16.mxu0 0
  %1117 = vmatmul.mubr.bf16.gmra.mrb[0].mxu0 %v728
  %v1118 = vpop.f32.mrb[0].mxu0
  %v1119 = vadd.f32 %v266, %v1118
  %v1120 = vpop.f32.mrb[0].mxu0
  %v1121 = vpop.f32.mrb[0].mxu0
  %v1122 = vadd.f32 %v266, %v1121
  %v1123 = vpop.f32.mrb[0].mxu0
  %1124 = vmatprep.mubr.bf16.mxu0 0
  %1125 = vmatmul.mubr.bf16.gmra.mrb[0].mxu0 %v729
  %v1126 = vpop.f32.mrb[0].mxu0
  %v1127 = vadd.f32 %v266, %v1126
  %v1128 = vpop.f32.mrb[0].mxu0
  %v1129 = vpop.f32.mrb[0].mxu0
  %v1130 = vadd.f32 %v266, %v1129
  %v1131 = vpop.f32.mrb[0].mxu0
  %1132 = vmatprep.mubr.bf16.mxu0 0
  %1133 = vmatmul.mubr.bf16.gmra.mrb[0].mxu0 %v730
  %v1134 = vpop.f32.mrb[0].mxu0
  %v1135 = vadd.f32 %v266, %v1134
  %v1136 = vpop.f32.mrb[0].mxu0
  %v1137 = vpop.f32.mrb[0].mxu0
  %v1138 = vadd.f32 %v266, %v1137
  %v1139 = vpop.f32.mrb[0].mxu0
  %1140 = vmatprep.mubr.bf16.mxu0 0
  %1141 = vmatmul.mubr.bf16.gmra.mrb[0].mxu0 %v731
  %v1142 = vpop.f32.mrb[0].mxu0
  %v1143 = vadd.f32 %v266, %v1142
  %v1144 = vpop.f32.mrb[0].mxu0
  %v1145 = vpop.f32.mrb[0].mxu0
  %v1146 = vadd.f32 %v266, %v1145
  %v1147 = vpop.f32.mrb[0].mxu0
  %1148 = vmatprep.mubr.bf16.mxu0 0
  %1149 = vmatmul.mubr.bf16.gmra.mrb[0].mxu0 %v732
  %v1150 = vpop.f32.mrb[0].mxu0
  %v1151 = vadd.f32 %v266, %v1150
  %v1152 = vpop.f32.mrb[0].mxu0
  %v1153 = vpop.f32.mrb[0].mxu0
  %v1154 = vadd.f32 %v266, %v1153
  %v1155 = vpop.f32.mrb[0].mxu0
  %1156 = vmatprep.mubr.bf16.mxu0 0
  %1157 = vmatmul.mubr.bf16.gmra.mrb[0].mxu0 %v733
  %v1158 = vpop.f32.mrb[0].mxu0
  %v1159 = vadd.f32 %v266, %v1158
  %v1160 = vpop.f32.mrb[0].mxu0
  %v1161 = vpop.f32.mrb[0].mxu0
  %v1162 = vadd.f32 %v266, %v1161
  %v1163 = vpop.f32.mrb[0].mxu0
  %1164 = vmatprep.mubr.bf16.mxu0 0
  %1165 = vmatmul.mubr.bf16.gmra.mrb[0].mxu0 %v734
  %v1166 = vpop.f32.mrb[0].mxu0
  %v1167 = vadd.f32 %v266, %v1166
  %v1168 = vpop.f32.mrb[0].mxu0
  %v1169 = vpop.f32.mrb[0].mxu0
  %v1170 = vadd.f32 %v266, %v1169
  %v1171 = vpop.f32.mrb[0].mxu0
  %1172 = vmatprep.mubr.bf16.mxu0 0
  %1173 = vmatmul.mubr.bf16.gmra.mrb[0].mxu0 %v735
  %v1174 = vpop.f32.mrb[0].mxu0
  %v1175 = vadd.f32 %v266, %v1174
  %v1176 = vpop.f32.mrb[0].mxu0
  %v1177 = vpop.f32.mrb[0].mxu0
  %v1178 = vadd.f32 %v266, %v1177
  %v1179 = vpop.f32.mrb[0].mxu0
  %1180 = vmatprep.mubr.bf16.mxu0 0
  %1181 = vmatmul.mubr.bf16.gmra.mrb[0].mxu0 %v736
  %v1182 = vpop.f32.mrb[0].mxu0
  %v1183 = vadd.f32 %v266, %v1182
  %v1184 = vpop.f32.mrb[0].mxu0
  %v1185 = vpop.f32.mrb[0].mxu0
  %v1186 = vadd.f32 %v266, %v1185
  %v1187 = vpop.f32.mrb[0].mxu0
  %1188 = vmatprep.mubr.bf16.mxu0 0
  %1189 = vmatmul.mubr.bf16.gmra.mrb[0].mxu0 %v737
  %v1190 = vpop.f32.mrb[0].mxu0
  %v1191 = vadd.f32 %v266, %v1190
  %v1192 = vpop.f32.mrb[0].mxu0
  %v1193 = vpop.f32.mrb[0].mxu0
  %v1194 = vadd.f32 %v266, %v1193
  %v1195 = vpop.f32.mrb[0].mxu0
  %1196 = vmatprep.mubr.bf16.mxu0 0
  %1197 = vmatmul.mubr.bf16.gmra.mrb[0].mxu0 %v738
  %v1198 = vpop.f32.mrb[0].mxu0
  %v1199 = vadd.f32 %v266, %v1198
  %v1200 = vpop.f32.mrb[0].mxu0
  %v1201 = vpop.f32.mrb[0].mxu0
  %v1202 = vadd.f32 %v266, %v1201
  %v1203 = vpop.f32.mrb[0].mxu0
  %1204 = vmatprep.mubr.bf16.mxu0 0
  %1205 = vmatmul.mubr.bf16.gmra.mrb[0].mxu0 %v739
  %v1206 = vpop.f32.mrb[0].mxu0
  %v1207 = vadd.f32 %v266, %v1206
  %v1208 = vpop.f32.mrb[0].mxu0
  %v1209 = vpop.f32.mrb[0].mxu0
  %v1210 = vadd.f32 %v266, %v1209
  %v1211 = vpop.f32.mrb[0].mxu0
  %1212 = vmatprep.mubr.bf16.mxu0 0
  %1213 = vmatmul.mubr.bf16.gmra.mrb[0].mxu0 %v740
  %v1214 = vpop.f32.mrb[0].mxu0
  %v1215 = vadd.f32 %v266, %v1214
  %v1216 = vpop.f32.mrb[0].mxu0
  %v1217 = vpop.f32.mrb[0].mxu0
  %v1218 = vadd.f32 %v266, %v1217
  %v1219 = vpop.f32.mrb[0].mxu0
  %1220 = vmatprep.mubr.bf16.mxu0 0
  %1221 = vmatmul.mubr.bf16.gmra.mrb[0].mxu0 %v741
  %v1222 = vpop.f32.mrb[0].mxu0
  %v1223 = vadd.f32 %v266, %v1222
  %v1224 = vpop.f32.mrb[0].mxu0
  %v1225 = vpop.f32.mrb[0].mxu0
  %v1226 = vadd.f32 %v266, %v1225
  %v1227 = vpop.f32.mrb[0].mxu0
  %1228 = vmatprep.mubr.bf16.mxu0 0
  %1229 = vmatmul.mubr.bf16.gmra.mrb[0].mxu0 %v742
  %v1230 = vpop.f32.mrb[0].mxu0
  %v1231 = vadd.f32 %v266, %v1230
  %v1232 = vpop.f32.mrb[0].mxu0
  %v1233 = vpop.f32.mrb[0].mxu0
  %v1234 = vadd.f32 %v266, %v1233
  %v1235 = vpop.f32.mrb[0].mxu0
  %1236 = vmatprep.mubr.bf16.mxu0 0
  %1237 = vmatmul.mubr.bf16.gmra.mrb[0].mxu0 %v743
  %v1238 = vpop.f32.mrb[0].mxu0
  %v1239 = vadd.f32 %v266, %v1238
  %v1240 = vpop.f32.mrb[0].mxu0
  %v1241 = vpop.f32.mrb[0].mxu0
  %v1242 = vadd.f32 %v266, %v1241
  %v1243 = vpop.f32.mrb[0].mxu0
  %1244 = vmatprep.mubr.bf16.mxu0 0
  %1245 = vmatmul.mubr.bf16.gmra.mrb[0].mxu0 %v744
  %v1246 = vpop.f32.mrb[0].mxu0
  %v1247 = vadd.f32 %v266, %v1246
  %v1248 = vpop.f32.mrb[0].mxu0
  %v1249 = vpop.f32.mrb[0].mxu0
  %v1250 = vadd.f32 %v266, %v1249
  %v1251 = vpop.f32.mrb[0].mxu0
  %1252 = vmatprep.mubr.bf16.mxu0 0
  %1253 = vmatmul.mubr.bf16.gmra.mrb[0].mxu0 %v745
  %v1254 = vpop.f32.mrb[0].mxu0
  %v1255 = vadd.f32 %v266, %v1254
  %v1256 = vpop.f32.mrb[0].mxu0
  %v1257 = vpop.f32.mrb[0].mxu0
  %v1258 = vadd.f32 %v266, %v1257
  %v1259 = vpop.f32.mrb[0].mxu0
  %1260 = vmatprep.mubr.bf16.mxu0 0
  %1261 = vmatmul.mubr.bf16.gmra.mrb[0].mxu0 %v746
  %v1262 = vpop.f32.mrb[0].mxu0
  %v1263 = vadd.f32 %v266, %v1262
  %v1264 = vpop.f32.mrb[0].mxu0
  %v1265 = vpop.f32.mrb[0].mxu0
  %v1266 = vadd.f32 %v266, %v1265
  %v1267 = vpop.f32.mrb[0].mxu0
  %1268 = vmatprep.mubr.bf16.mxu0 0
  %1269 = vmatmul.mubr.bf16.gmra.mrb[0].mxu0 %v747
  %v1270 = vpop.f32.mrb[0].mxu0
  %v1271 = vadd.f32 %v266, %v1270
  %v1272 = vpop.f32.mrb[0].mxu0
  %v1273 = vpop.f32.mrb[0].mxu0
  %v1274 = vadd.f32 %v266, %v1273
  %v1275 = vpop.f32.mrb[0].mxu0
  %1276 = vmatprep.mubr.bf16.mxu0 0
  %1277 = vmatmul.mubr.bf16.gmra.mrb[0].mxu0 %v748
  %v1278 = vpop.f32.mrb[0].mxu0
  %v1279 = vadd.f32 %v266, %v1278
  %v1280 = vpop.f32.mrb[0].mxu0
  %v1281 = vpop.f32.mrb[0].mxu0
  %v1282 = vadd.f32 %v266, %v1281
  %v1283 = vpop.f32.mrb[0].mxu0
  %1284 = vmatprep.mubr.bf16.mxu0 0
  %1285 = vmatmul.mubr.bf16.gmra.mrb[0].mxu0 %v749
  %v1286 = vpop.f32.mrb[0].mxu0
  %v1287 = vadd.f32 %v266, %v1286
  %v1288 = vpop.f32.mrb[0].mxu0
  %v1289 = vpop.f32.mrb[0].mxu0
  %v1290 = vadd.f32 %v266, %v1289
  %v1291 = vpop.f32.mrb[0].mxu0
  %1292 = vmatprep.mubr.bf16.mxu0 0
  %1293 = vmatmul.mubr.bf16.gmra.mrb[0].mxu0 %v750
  %v1294 = vpop.f32.mrb[0].mxu0
  %v1295 = vadd.f32 %v266, %v1294
  %v1296 = vpop.f32.mrb[0].mxu0
  %v1297 = vpop.f32.mrb[0].mxu0
  %v1298 = vadd.f32 %v266, %v1297
  %v1299 = vpop.f32.mrb[0].mxu0
  %1300 = vmatprep.mubr.bf16.mxu0 0
  %1301 = vmatmul.mubr.bf16.gmra.mrb[0].mxu0 %v751
  %v1302 = vpop.f32.mrb[0].mxu0
  %v1303 = vadd.f32 %v266, %v1302
  %v1304 = vpop.f32.mrb[0].mxu0
  %v1305 = vpop.f32.mrb[0].mxu0
  %v1306 = vadd.f32 %v266, %v1305
  %v1307 = vpop.f32.mrb[0].mxu0
  %1308 = vmatprep.mubr.bf16.mxu0 0
  %1309 = vmatmul.mubr.bf16.gmra.mrb[0].mxu0 %v752
  %v1310 = vpop.f32.mrb[0].mxu0
  %v1311 = vadd.f32 %v266, %v1310
  %v1312 = vpop.f32.mrb[0].mxu0
  %v1313 = vpop.f32.mrb[0].mxu0
  %v1314 = vadd.f32 %v266, %v1313
  %v1315 = vpop.f32.mrb[0].mxu0
  %1316 = vmatprep.mubr.bf16.mxu0 0
  %1317 = vmatmul.mubr.bf16.gmra.mrb[0].mxu0 %v753
  %v1318 = vpop.f32.mrb[0].mxu0
  %v1319 = vadd.f32 %v266, %v1318
  %v1320 = vpop.f32.mrb[0].mxu0
  %v1321 = vpop.f32.mrb[0].mxu0
  %v1322 = vadd.f32 %v266, %v1321
  %v1323 = vpop.f32.mrb[0].mxu0
  %1324 = vmatprep.mubr.bf16.mxu0 0
  %1325 = vmatmul.mubr.bf16.gmra.mrb[0].mxu0 %v754
  %v1326 = vpop.f32.mrb[0].mxu0
  %v1327 = vadd.f32 %v266, %v1326
  %v1328 = vpop.f32.mrb[0].mxu0
  %v1329 = vpop.f32.mrb[0].mxu0
  %v1330 = vadd.f32 %v266, %v1329
  %v1331 = vpop.f32.mrb[0].mxu0
  %1332 = vmatprep.mubr.bf16.mxu0 0
  %1333 = vmatmul.mubr.bf16.gmra.mrb[0].mxu0 %v755
  %v1334 = vpop.f32.mrb[0].mxu0
  %v1335 = vadd.f32 %v266, %v1334
  %v1336 = vpop.f32.mrb[0].mxu0
  %v1337 = vpop.f32.mrb[0].mxu0
  %v1338 = vadd.f32 %v266, %v1337
  %v1339 = vpop.f32.mrb[0].mxu0
  %1340 = vmatprep.mubr.bf16.mxu0 0
  %1341 = vmatmul.mubr.bf16.gmra.mrb[0].mxu0 %v756
  %v1342 = vpop.f32.mrb[0].mxu0
  %v1343 = vadd.f32 %v266, %v1342
  %v1344 = vpop.f32.mrb[0].mxu0
  %v1345 = vpop.f32.mrb[0].mxu0
  %v1346 = vadd.f32 %v266, %v1345
  %v1347 = vpop.f32.mrb[0].mxu0
  %1348 = vmatprep.mubr.bf16.mxu0 0
  %1349 = vmatmul.mubr.bf16.gmra.mrb[0].mxu0 %v757
  %v1350 = vpop.f32.mrb[0].mxu0
  %v1351 = vadd.f32 %v266, %v1350
  %v1352 = vpop.f32.mrb[0].mxu0
  %v1353 = vpop.f32.mrb[0].mxu0
  %v1354 = vadd.f32 %v266, %v1353
  %v1355 = vpop.f32.mrb[0].mxu0
  %1356 = vmatprep.mubr.bf16.mxu0 0
  %1357 = vmatmul.mubr.bf16.gmra.mrb[0].mxu0 %v758
  %v1358 = vpop.f32.mrb[0].mxu0
  %v1359 = vadd.f32 %v266, %v1358
  %v1360 = vpop.f32.mrb[0].mxu0
  %v1361 = vpop.f32.mrb[0].mxu0
  %v1362 = vadd.f32 %v266, %v1361
  %v1363 = vpop.f32.mrb[0].mxu0
  %1364 = vmatprep.mubr.bf16.mxu0 0
  %1365 = vmatmul.mubr.bf16.gmra.mrb[0].mxu0 %v759
  %v1366 = vpop.f32.mrb[0].mxu0
  %v1367 = vadd.f32 %v266, %v1366
  %v1368 = vpop.f32.mrb[0].mxu0
  %v1369 = vpop.f32.mrb[0].mxu0
  %v1370 = vadd.f32 %v266, %v1369
  %v1371 = vpop.f32.mrb[0].mxu0
  %1372 = vmatprep.mubr.bf16.mxu0 0
  %1373 = vmatmul.mubr.bf16.gmra.mrb[0].mxu0 %v760
  %v1374 = vpop.f32.mrb[0].mxu0
  %v1375 = vadd.f32 %v266, %v1374
  %v1376 = vpop.f32.mrb[0].mxu0
  %v1377 = vpop.f32.mrb[0].mxu0
  %v1378 = vadd.f32 %v266, %v1377
  %v1379 = vpop.f32.mrb[0].mxu0
  %1380 = vmatprep.mubr.bf16.mxu0 0
  %1381 = vmatmul.mubr.bf16.gmra.mrb[0].mxu0 %v761
  %v1382 = vpop.f32.mrb[0].mxu0
  %v1383 = vadd.f32 %v266, %v1382
  %v1384 = vpop.f32.mrb[0].mxu0
  %v1385 = vpop.f32.mrb[0].mxu0
  %v1386 = vadd.f32 %v266, %v1385
  %v1387 = vpop.f32.mrb[0].mxu0
  %1388 = vmatprep.mubr.bf16.mxu0 0
  %1389 = vmatmul.mubr.bf16.gmra.mrb[0].mxu0 %v762
  %v1390 = vpop.f32.mrb[0].mxu0
  %v1391 = vadd.f32 %v266, %v1390
  %v1392 = vpop.f32.mrb[0].mxu0
  %v1393 = vpop.f32.mrb[0].mxu0
  %v1394 = vadd.f32 %v266, %v1393
  %v1395 = vpop.f32.mrb[0].mxu0
  %1396 = vmatprep.mubr.bf16.mxu0 0
  %1397 = vmatmul.mubr.bf16.gmra.mrb[0].mxu0 %v763
  %v1398 = vpop.f32.mrb[0].mxu0
  %v1399 = vadd.f32 %v266, %v1398
  %v1400 = vpop.f32.mrb[0].mxu0
  %v1401 = vpop.f32.mrb[0].mxu0
  %v1402 = vadd.f32 %v266, %v1401
  %v1403 = vpop.f32.mrb[0].mxu0
  %1404 = vmatprep.mubr.bf16.mxu0 0
  %1405 = vmatmul.mubr.bf16.gmra.mrb[0].mxu0 %v764
  %v1406 = vpop.f32.mrb[0].mxu0
  %v1407 = vadd.f32 %v266, %v1406
  %v1408 = vpop.f32.mrb[0].mxu0
  %v1409 = vpop.f32.mrb[0].mxu0
  %v1410 = vadd.f32 %v266, %v1409
  %v1411 = vpop.f32.mrb[0].mxu0
  %1412 = vmatprep.mubr.bf16.mxu0 0
  %1413 = vmatmul.mubr.bf16.gmra.mrb[0].mxu0 %v765
  %v1414 = vpop.f32.mrb[0].mxu0
  %v1415 = vadd.f32 %v266, %v1414
  %v1416 = vpop.f32.mrb[0].mxu0
  %v1417 = vpop.f32.mrb[0].mxu0
  %v1418 = vadd.f32 %v266, %v1417
  %v1419 = vpop.f32.mrb[0].mxu0
  %1420 = vmatprep.mubr.bf16.mxu0 0
  %1421 = vmatmul.mubr.bf16.gmra.mrb[0].mxu0 %v766
  %v1422 = vpop.f32.mrb[0].mxu0
  %v1423 = vadd.f32 %v266, %v1422
  %v1424 = vpop.f32.mrb[0].mxu0
  %v1425 = vpop.f32.mrb[0].mxu0
  %v1426 = vadd.f32 %v266, %v1425
  %v1427 = vpop.f32.mrb[0].mxu0
  %1428 = vmatprep.mubr.bf16.mxu0 0
  %1429 = vmatmul.mubr.bf16.gmra.mrb[0].mxu0 %v767
  %v1430 = vpop.f32.mrb[0].mxu0
  %v1431 = vadd.f32 %v266, %v1430
  %v1432 = vpop.f32.mrb[0].mxu0
  %v1433 = vpop.f32.mrb[0].mxu0
  %v1434 = vadd.f32 %v266, %v1433
  %v1435 = vpop.f32.mrb[0].mxu0
  %1436 = vmatprep.mubr.bf16.mxu0 0
  %1437 = vmatmul.mubr.bf16.gmra.mrb[0].mxu0 %v768
  %v1438 = vpop.f32.mrb[0].mxu0
  %v1439 = vadd.f32 %v266, %v1438
  %v1440 = vpop.f32.mrb[0].mxu0
  %v1441 = vpop.f32.mrb[0].mxu0
  %v1442 = vadd.f32 %v266, %v1441
  %v1443 = vpop.f32.mrb[0].mxu0
  %1444 = vmatprep.mubr.bf16.mxu0 0
  %1445 = vmatmul.mubr.bf16.gmra.mrb[0].mxu0 %v769
  %v1446 = vpop.f32.mrb[0].mxu0
  %v1447 = vadd.f32 %v266, %v1446
  %v1448 = vpop.f32.mrb[0].mxu0
  %v1449 = vpop.f32.mrb[0].mxu0
  %v1450 = vadd.f32 %v266, %v1449
  %v1451 = vpop.f32.mrb[0].mxu0
  %1452 = vmatprep.mubr.bf16.mxu0 0
  %1453 = vmatmul.mubr.bf16.gmra.mrb[0].mxu0 %v770
  %v1454 = vpop.f32.mrb[0].mxu0
  %v1455 = vadd.f32 %v266, %v1454
  %v1456 = vpop.f32.mrb[0].mxu0
  %v1457 = vpop.f32.mrb[0].mxu0
  %v1458 = vadd.f32 %v266, %v1457
  %v1459 = vpop.f32.mrb[0].mxu0
  %1460 = vmatprep.mubr.bf16.mxu0 0
  %1461 = vmatmul.mubr.bf16.gmra.mrb[0].mxu0 %v771
  %v1462 = vpop.f32.mrb[0].mxu0
  %v1463 = vadd.f32 %v266, %v1462
  %v1464 = vpop.f32.mrb[0].mxu0
  %v1465 = vpop.f32.mrb[0].mxu0
  %v1466 = vadd.f32 %v266, %v1465
  %v1467 = vpop.f32.mrb[0].mxu0
  %1468 = vmatprep.mubr.bf16.mxu0 0
  %1469 = vmatmul.mubr.bf16.gmra.mrb[0].mxu0 %v772
  %v1470 = vpop.f32.mrb[0].mxu0
  %v1471 = vadd.f32 %v266, %v1470
  %v1472 = vpop.f32.mrb[0].mxu0
  %v1473 = vpop.f32.mrb[0].mxu0
  %v1474 = vadd.f32 %v266, %v1473
  %v1475 = vpop.f32.mrb[0].mxu0
  %1476 = vmatprep.mubr.bf16.mxu0 0
  %1477 = vmatmul.mubr.bf16.gmra.mrb[0].mxu0 %v773
  %v1478 = vpop.f32.mrb[0].mxu0
  %v1479 = vadd.f32 %v266, %v1478
  %v1480 = vpop.f32.mrb[0].mxu0
  %v1481 = vpop.f32.mrb[0].mxu0
  %v1482 = vadd.f32 %v266, %v1481
  %v1483 = vpop.f32.mrb[0].mxu0
  %1484 = vmatprep.mubr.bf16.mxu0 0
  %1485 = vmatmul.mubr.bf16.gmra.mrb[0].mxu0 %v774
  %v1486 = vpop.f32.mrb[0].mxu0
  %v1487 = vadd.f32 %v266, %v1486
  %v1488 = vpop.f32.mrb[0].mxu0
  %v1489 = vpop.f32.mrb[0].mxu0
  %v1490 = vadd.f32 %v266, %v1489
  %v1491 = vpop.f32.mrb[0].mxu0
  %1492 = vmatprep.mubr.bf16.mxu0 0
  %1493 = vmatmul.mubr.bf16.gmra.mrb[0].mxu0 %v775
  %v1494 = vpop.f32.mrb[0].mxu0
  %v1495 = vadd.f32 %v266, %v1494
  %v1496 = vpop.f32.mrb[0].mxu0
  %v1497 = vpop.f32.mrb[0].mxu0
  %v1498 = vadd.f32 %v266, %v1497
  %v1499 = vpop.f32.mrb[0].mxu0
  %1500 = vmatprep.mubr.bf16.mxu0 0
  %1501 = vmatmul.mubr.bf16.gmra.mrb[0].mxu0 %v776
  %v1502 = vpop.f32.mrb[0].mxu0
  %v1503 = vadd.f32 %v266, %v1502
  %v1504 = vpop.f32.mrb[0].mxu0
  %v1505 = vpop.f32.mrb[0].mxu0
  %v1506 = vadd.f32 %v266, %v1505
  %v1507 = vpop.f32.mrb[0].mxu0
  %1508 = vmatprep.mubr.bf16.mxu0 0
  %1509 = vmatmul.mubr.bf16.gmra.mrb[0].mxu0 %v777
  %v1510 = vpop.f32.mrb[0].mxu0
  %v1511 = vadd.f32 %v266, %v1510
  %v1512 = vpop.f32.mrb[0].mxu0
  %v1513 = vpop.f32.mrb[0].mxu0
  %v1514 = vadd.f32 %v266, %v1513
  %v1515 = vpop.f32.mrb[0].mxu0
  %1516 = vmatprep.mubr.bf16.mxu0 0
  %1517 = vmatmul.mubr.bf16.gmra.mrb[0].mxu0 %v778
  %v1518 = vpop.f32.mrb[0].mxu0
  %v1519 = vadd.f32 %v266, %v1518
  %v1520 = vpop.f32.mrb[0].mxu0
  %v1521 = vpop.f32.mrb[0].mxu0
  %v1522 = vadd.f32 %v266, %v1521
  %v1523 = vpop.f32.mrb[0].mxu0
  %1524 = vmatprep.mubr.bf16.mxu0 0
  %1525 = vmatmul.mubr.bf16.gmra.mrb[0].mxu0 %v779
  %v1526 = vpop.f32.mrb[0].mxu0
  %v1527 = vadd.f32 %v266, %v1526
  %v1528 = vpop.f32.mrb[0].mxu0
  %v1529 = vpop.f32.mrb[0].mxu0
  %v1530 = vadd.f32 %v266, %v1529
  %v1531 = vpop.f32.mrb[0].mxu0
  %1532 = vmatprep.mubr.bf16.mxu0 0
  %1533 = vmatmul.mubr.bf16.gmra.mrb[0].mxu0 %v780
  %v1534 = vpop.f32.mrb[0].mxu0
  %v1535 = vadd.f32 %v266, %v1534
  %v1536 = vpop.f32.mrb[0].mxu0
  %v1537 = vpop.f32.mrb[0].mxu0
  %v1538 = vadd.f32 %v266, %v1537
  %v1539 = vpop.f32.mrb[0].mxu0
  %1540 = vmatprep.mubr.bf16.mxu0 0
  %1541 = vmatmul.mubr.bf16.gmra.mrb[0].mxu0 %v781
  %v1542 = vpop.f32.mrb[0].mxu0
  %v1543 = vadd.f32 %v266, %v1542
  %v1544 = vpop.f32.mrb[0].mxu0
  %v1545 = vpop.f32.mrb[0].mxu0
  %v1546 = vadd.f32 %v266, %v1545
  %v1547 = vpop.f32.mrb[0].mxu0
  %1548 = vmatprep.mubr.bf16.mxu0 0
  %1549 = vmatmul.mubr.bf16.gmra.mrb[0].mxu0 %v782
  %v1550 = vpop.f32.mrb[0].mxu0
  %v1551 = vadd.f32 %v266, %v1550
  %v1552 = vpop.f32.mrb[0].mxu0
  %v1553 = vpop.f32.mrb[0].mxu0
  %v1554 = vadd.f32 %v266, %v1553
  %v1555 = vpop.f32.mrb[0].mxu0
  %1556 = vmatprep.mubr.bf16.mxu0 0
  %1557 = vmatmul.mubr.bf16.gmra.mrb[0].mxu0 %v783
  %v1558 = vpop.f32.mrb[0].mxu0
  %v1559 = vadd.f32 %v266, %v1558
  %v1560 = vpop.f32.mrb[0].mxu0
  %v1561 = vpop.f32.mrb[0].mxu0
  %v1562 = vadd.f32 %v266, %v1561
  %v1563 = vpop.f32.mrb[0].mxu0
  %1564 = vmatprep.mubr.bf16.mxu0 0
  %1565 = vmatmul.mubr.bf16.gmra.mrb[0].mxu0 %v784
  %v1566 = vpop.f32.mrb[0].mxu0
  %v1567 = vadd.f32 %v266, %v1566
  %v1568 = vpop.f32.mrb[0].mxu0
  %v1569 = vpop.f32.mrb[0].mxu0
  %v1570 = vadd.f32 %v266, %v1569
  %v1571 = vpop.f32.mrb[0].mxu0
  %1572 = vmatprep.mubr.bf16.mxu0 0
  %1573 = vmatmul.mubr.bf16.gmra.mrb[0].mxu0 %v785
  %v1574 = vpop.f32.mrb[0].mxu0
  %v1575 = vadd.f32 %v266, %v1574
  %v1576 = vpop.f32.mrb[0].mxu0
  %v1577 = vpop.f32.mrb[0].mxu0
  %v1578 = vadd.f32 %v266, %v1577
  %v1579 = vpop.f32.mrb[0].mxu0
  %1580 = vmatprep.mubr.bf16.mxu0 0
  %1581 = vmatmul.mubr.bf16.gmra.mrb[0].mxu0 %v786
  %v1582 = vpop.f32.mrb[0].mxu0
  %v1583 = vadd.f32 %v266, %v1582
  %v1584 = vpop.f32.mrb[0].mxu0
  %v1585 = vpop.f32.mrb[0].mxu0
  %v1586 = vadd.f32 %v266, %v1585
  %v1587 = vpop.f32.mrb[0].mxu0
  %1588 = vmatprep.mubr.bf16.mxu0 0
  %1589 = vmatmul.mubr.bf16.gmra.mrb[0].mxu0 %v787
  %v1590 = vpop.f32.mrb[0].mxu0
  %v1591 = vadd.f32 %v266, %v1590
  %v1592 = vpop.f32.mrb[0].mxu0
  %v1593 = vpop.f32.mrb[0].mxu0
  %v1594 = vadd.f32 %v266, %v1593
  %v1595 = vpop.f32.mrb[0].mxu0
  %1596 = vmatprep.mubr.bf16.mxu0 0
  %1597 = vmatmul.mubr.bf16.gmra.mrb[0].mxu0 %v788
  %v1598 = vpop.f32.mrb[0].mxu0
  %v1599 = vadd.f32 %v266, %v1598
  %v1600 = vpop.f32.mrb[0].mxu0
  %v1601 = vpop.f32.mrb[0].mxu0
  %v1602 = vadd.f32 %v266, %v1601
  %v1603 = vpop.f32.mrb[0].mxu0
  %1604 = vmatprep.mubr.bf16.mxu0 0
  %1605 = vmatmul.mubr.bf16.gmra.mrb[0].mxu0 %v789
  %v1606 = vpop.f32.mrb[0].mxu0
  %v1607 = vadd.f32 %v266, %v1606
  %v1608 = vpop.f32.mrb[0].mxu0
  %v1609 = vpop.f32.mrb[0].mxu0
  %v1610 = vadd.f32 %v266, %v1609
  %v1611 = vpop.f32.mrb[0].mxu0
  %1612 = vmatprep.mubr.bf16.mxu0 0
  %1613 = vmatmul.mubr.bf16.gmra.mrb[0].mxu0 %v790
  %v1614 = vpop.f32.mrb[0].mxu0
  %v1615 = vadd.f32 %v266, %v1614
  %v1616 = vpop.f32.mrb[0].mxu0
  %v1617 = vpop.f32.mrb[0].mxu0
  %v1618 = vadd.f32 %v266, %v1617
  %v1619 = vpop.f32.mrb[0].mxu0
  %1620 = vmatprep.mubr.bf16.mxu0 0
  %1621 = vmatmul.mubr.bf16.gmra.mrb[0].mxu0 %v791
  %v1622 = vpop.f32.mrb[0].mxu0
  %v1623 = vadd.f32 %v266, %v1622
  %v1624 = vpop.f32.mrb[0].mxu0
  %v1625 = vpop.f32.mrb[0].mxu0
  %v1626 = vadd.f32 %v266, %v1625
  %v1627 = vpop.f32.mrb[0].mxu0
  %1628 = vmatprep.mubr.bf16.mxu0 0
  %1629 = vmatmul.mubr.bf16.gmra.mrb[0].mxu0 %v792
  %v1630 = vpop.f32.mrb[0].mxu0
  %v1631 = vadd.f32 %v266, %v1630
  %v1632 = vpop.f32.mrb[0].mxu0
  %v1633 = vpop.f32.mrb[0].mxu0
  %v1634 = vadd.f32 %v266, %v1633
  %v1635 = vpop.f32.mrb[0].mxu0
  %1636 = vmatprep.mubr.bf16.mxu0 0
  %1637 = vmatmul.mubr.bf16.gmra.mrb[0].mxu0 %v793
  %v1638 = vpop.f32.mrb[0].mxu0
  %v1639 = vadd.f32 %v266, %v1638
  %v1640 = vpop.f32.mrb[0].mxu0
  %v1641 = vpop.f32.mrb[0].mxu0
  %v1642 = vadd.f32 %v266, %v1641
  %v1643 = vpop.f32.mrb[0].mxu0
  %1644 = vmatprep.mubr.bf16.mxu0 0
  %1645 = vmatmul.mubr.bf16.gmra.mrb[0].mxu0 %v794
  %v1646 = vpop.f32.mrb[0].mxu0
  %v1647 = vadd.f32 %v266, %v1646
  %v1648 = vpop.f32.mrb[0].mxu0
  %v1649 = vpop.f32.mrb[0].mxu0
  %v1650 = vadd.f32 %v266, %v1649
  %v1651 = vpop.f32.mrb[0].mxu0
  %1652 = vmatprep.mubr.bf16.mxu0 0
  %1653 = vmatmul.mubr.bf16.gmra.mrb[0].mxu0 %v795
  %v1654 = vpop.f32.mrb[0].mxu0
  %v1655 = vadd.f32 %v266, %v1654
  %v1656 = vpop.f32.mrb[0].mxu0
  %v1657 = vpop.f32.mrb[0].mxu0
  %v1658 = vadd.f32 %v266, %v1657
  %v1659 = vpop.f32.mrb[0].mxu0
  %1660 = vmatprep.mubr.bf16.mxu0 0
  %1661 = vmatmul.mubr.bf16.gmra.mrb[0].mxu0 %v796
  %v1662 = vpop.f32.mrb[0].mxu0
  %v1663 = vadd.f32 %v266, %v1662
  %v1664 = vpop.f32.mrb[0].mxu0
  %v1665 = vpop.f32.mrb[0].mxu0
  %v1666 = vadd.f32 %v266, %v1665
  %v1667 = vpop.f32.mrb[0].mxu0
  %1668 = vmatprep.mubr.bf16.mxu0 0
  %1669 = vmatmul.mubr.bf16.gmra.mrb[0].mxu0 %v797
  %v1670 = vpop.f32.mrb[0].mxu0
  %v1671 = vadd.f32 %v266, %v1670
  %v1672 = vpop.f32.mrb[0].mxu0
  %v1673 = vpop.f32.mrb[0].mxu0
  %v1674 = vadd.f32 %v266, %v1673
  %v1675 = vpop.f32.mrb[0].mxu0
  %1676 = vmatprep.mubr.bf16.mxu0 0
  %1677 = vmatmul.mubr.bf16.gmra.mrb[0].mxu0 %v798
  %v1678 = vpop.f32.mrb[0].mxu0
  %v1679 = vadd.f32 %v266, %v1678
  %v1680 = vpop.f32.mrb[0].mxu0
  %v1681 = vpop.f32.mrb[0].mxu0
  %v1682 = vadd.f32 %v266, %v1681
  %v1683 = vpop.f32.mrb[0].mxu0
  %1684 = vmatprep.mubr.bf16.mxu0 0
  %1685 = vmatmul.mubr.bf16.gmra.mrb[0].mxu0 %v799
  %v1686 = vpop.f32.mrb[0].mxu0
  %v1687 = vadd.f32 %v266, %v1686
  %v1688 = vpop.f32.mrb[0].mxu0
  %v1689 = vpop.f32.mrb[0].mxu0
  %v1690 = vadd.f32 %v266, %v1689
  %v1691 = vpop.f32.mrb[0].mxu0
  %1692 = vmatprep.mubr.bf16.mxu0 0
  %1693 = vmatmul.mubr.bf16.gmra.mrb[0].mxu0 %v800
  %v1694 = vpop.f32.mrb[0].mxu0
  %v1695 = vadd.f32 %v266, %v1694
  %v1696 = vpop.f32.mrb[0].mxu0
  %v1697 = vpop.f32.mrb[0].mxu0
  %v1698 = vadd.f32 %v266, %v1697
  %v1699 = vpop.f32.mrb[0].mxu0
  %1700 = vmatprep.mubr.bf16.mxu0 0
  %1701 = vmatmul.mubr.bf16.gmra.mrb[0].mxu0 %v801
  %v1702 = vpop.f32.mrb[0].mxu0
  %v1703 = vadd.f32 %v266, %v1702
  %v1704 = vpop.f32.mrb[0].mxu0
  %v1705 = vpop.f32.mrb[0].mxu0
  %v1706 = vadd.f32 %v266, %v1705
  %v1707 = vpop.f32.mrb[0].mxu0
  %1708 = vmatprep.mubr.bf16.mxu0 0
  %1709 = vmatmul.mubr.bf16.gmra.mrb[0].mxu0 %v802
  %v1710 = vpop.f32.mrb[0].mxu0
  %v1711 = vadd.f32 %v266, %v1710
  %v1712 = vpop.f32.mrb[0].mxu0
  %v1713 = vpop.f32.mrb[0].mxu0
  %v1714 = vadd.f32 %v266, %v1713
  %v1715 = vpop.f32.mrb[0].mxu0
  %1716 = vmatprep.mubr.bf16.mxu0 0
  %1717 = vmatmul.mubr.bf16.gmra.mrb[0].mxu0 %v803
  %v1718 = vpop.f32.mrb[0].mxu0
  %v1719 = vadd.f32 %v266, %v1718
  %v1720 = vpop.f32.mrb[0].mxu0
  %v1721 = vpop.f32.mrb[0].mxu0
  %v1722 = vadd.f32 %v266, %v1721
  %v1723 = vpop.f32.mrb[0].mxu0
  %1724 = vmatprep.mubr.bf16.mxu0 0
  %1725 = vmatmul.mubr.bf16.gmra.mrb[0].mxu0 %v804
  %v1726 = vpop.f32.mrb[0].mxu0
  %v1727 = vadd.f32 %v266, %v1726
  %v1728 = vpop.f32.mrb[0].mxu0
  %v1729 = vpop.f32.mrb[0].mxu0
  %v1730 = vadd.f32 %v266, %v1729
  %v1731 = vpop.f32.mrb[0].mxu0
  %1732 = vmatprep.mubr.bf16.mxu0 0
  %1733 = vmatmul.mubr.bf16.gmra.mrb[0].mxu0 %v805
  %v1734 = vpop.f32.mrb[0].mxu0
  %v1735 = vadd.f32 %v266, %v1734
  %v1736 = vpop.f32.mrb[0].mxu0
  %v1737 = vpop.f32.mrb[0].mxu0
  %v1738 = vadd.f32 %v266, %v1737
  %v1739 = vpop.f32.mrb[0].mxu0
  %1740 = vmatprep.mubr.bf16.mxu0 0
  %1741 = vmatmul.mubr.bf16.gmra.mrb[0].mxu0 %v806
  %v1742 = vpop.f32.mrb[0].mxu0
  %v1743 = vadd.f32 %v266, %v1742
  %v1744 = vpop.f32.mrb[0].mxu0
  %v1745 = vpop.f32.mrb[0].mxu0
  %v1746 = vadd.f32 %v266, %v1745
  %v1747 = vpop.f32.mrb[0].mxu0
  %1748 = vmatprep.mubr.bf16.mxu0 0
  %1749 = vmatmul.mubr.bf16.gmra.mrb[0].mxu0 %v807
  %v1750 = vpop.f32.mrb[0].mxu0
  %v1751 = vadd.f32 %v266, %v1750
  %v1752 = vpop.f32.mrb[0].mxu0
  %v1753 = vpop.f32.mrb[0].mxu0
  %v1754 = vadd.f32 %v266, %v1753
  %v1755 = vpop.f32.mrb[0].mxu0
  %1756 = vmatprep.mubr.bf16.mxu0 0
  %1757 = vmatmul.mubr.bf16.gmra.mrb[0].mxu0 %v808
  %v1758 = vpop.f32.mrb[0].mxu0
  %v1759 = vadd.f32 %v266, %v1758
  %v1760 = vpop.f32.mrb[0].mxu0
  %v1761 = vpop.f32.mrb[0].mxu0
  %v1762 = vadd.f32 %v266, %v1761
  %v1763 = vpop.f32.mrb[0].mxu0
  %1764 = vmatprep.mubr.bf16.mxu0 0
  %1765 = vmatmul.mubr.bf16.gmra.mrb[0].mxu0 %v809
  %v1766 = vpop.f32.mrb[0].mxu0
  %v1767 = vadd.f32 %v266, %v1766
  %v1768 = vpop.f32.mrb[0].mxu0
  %v1769 = vpop.f32.mrb[0].mxu0
  %v1770 = vadd.f32 %v266, %v1769
  %v1771 = vpop.f32.mrb[0].mxu0
  %1772 = vmatprep.mubr.bf16.mxu0 0
  %1773 = vmatmul.mubr.bf16.gmra.mrb[0].mxu0 %v810
  %v1774 = vpop.f32.mrb[0].mxu0
  %v1775 = vadd.f32 %v266, %v1774
  %v1776 = vpop.f32.mrb[0].mxu0
  %v1777 = vpop.f32.mrb[0].mxu0
  %v1778 = vadd.f32 %v266, %v1777
  %v1779 = vpop.f32.mrb[0].mxu0
  %1780 = vmatprep.mubr.bf16.mxu0 0
  %1781 = vmatmul.mubr.bf16.gmra.mrb[0].mxu0 %v811
  %v1782 = vpop.f32.mrb[0].mxu0
  %v1783 = vadd.f32 %v266, %v1782
  %v1784 = vpop.f32.mrb[0].mxu0
  %v1785 = vpop.f32.mrb[0].mxu0
  %v1786 = vadd.f32 %v266, %v1785
  %v1787 = vpop.f32.mrb[0].mxu0
  %1788 = vmatprep.mubr.bf16.mxu0 0
  %1789 = vmatmul.mubr.bf16.gmra.mrb[0].mxu0 %v812
  %v1790 = vpop.f32.mrb[0].mxu0
  %v1791 = vadd.f32 %v266, %v1790
  %v1792 = vpop.f32.mrb[0].mxu0
  %v1793 = vpop.f32.mrb[0].mxu0
  %v1794 = vadd.f32 %v266, %v1793
  %v1795 = vpop.f32.mrb[0].mxu0
  %1796 = vmatprep.mubr.bf16.mxu0 0
  %1797 = vmatmul.mubr.bf16.gmra.mrb[0].mxu0 %v813
  %v1798 = vpop.f32.mrb[0].mxu0
  %v1799 = vadd.f32 %v266, %v1798
  %v1800 = vpop.f32.mrb[0].mxu0
  %v1801 = vpop.f32.mrb[0].mxu0
  %v1802 = vadd.f32 %v266, %v1801
  %v1803 = vpop.f32.mrb[0].mxu0
  %1804 = vmatprep.mubr.bf16.mxu0 0
  %1805 = vmatmul.mubr.bf16.gmra.mrb[0].mxu0 %v814
  %v1806 = vpop.f32.mrb[0].mxu0
  %v1807 = vadd.f32 %v266, %v1806
  %v1808 = vpop.f32.mrb[0].mxu0
  %v1809 = vpop.f32.mrb[0].mxu0
  %v1810 = vadd.f32 %v266, %v1809
  %v1811 = vpop.f32.mrb[0].mxu0
  %1812 = vmatprep.mubr.bf16.mxu0 0
  %1813 = vmatmul.mubr.bf16.gmra.mrb[0].mxu0 %v815
  %v1814 = vpop.f32.mrb[0].mxu0
  %v1815 = vadd.f32 %v266, %v1814
  %v1816 = vpop.f32.mrb[0].mxu0
  %v1817 = vpop.f32.mrb[0].mxu0
  %v1818 = vadd.f32 %v266, %v1817
  %v1819 = vpop.f32.mrb[0].mxu0
  %1820 = vmatprep.mubr.bf16.mxu0 0
  %1821 = vmatmul.mubr.bf16.gmra.mrb[0].mxu0 %v816
  %v1822 = vpop.f32.mrb[0].mxu0
  %v1823 = vadd.f32 %v266, %v1822
  %v1824 = vpop.f32.mrb[0].mxu0
  %v1825 = vpop.f32.mrb[0].mxu0
  %v1826 = vadd.f32 %v266, %v1825
  %v1827 = vpop.f32.mrb[0].mxu0
  %1828 = vmatprep.mubr.bf16.mxu0 0
  %1829 = vmatmul.mubr.bf16.gmra.mrb[0].mxu0 %v817
  %v1830 = vpop.f32.mrb[0].mxu0
  %v1831 = vadd.f32 %v266, %v1830
  %v1832 = vpop.f32.mrb[0].mxu0
  %v1833 = vpop.f32.mrb[0].mxu0
  %v1834 = vadd.f32 %v266, %v1833
  %v1835 = vpop.f32.mrb[0].mxu0
  %1836 = vmatprep.mubr.bf16.mxu0 0
  %1837 = vmatmul.mubr.bf16.gmra.mrb[0].mxu0 %v818
  %v1838 = vpop.f32.mrb[0].mxu0
  %v1839 = vadd.f32 %v266, %v1838
  %v1840 = vpop.f32.mrb[0].mxu0
  %v1841 = vpop.f32.mrb[0].mxu0
  %v1842 = vadd.f32 %v266, %v1841
  %v1843 = vpop.f32.mrb[0].mxu0
  %1844 = vmatprep.mubr.bf16.mxu0 0
  %1845 = vmatmul.mubr.bf16.gmra.mrb[0].mxu0 %v819
  %v1846 = vpop.f32.mrb[0].mxu0
  %v1847 = vadd.f32 %v266, %v1846
  %v1848 = vpop.f32.mrb[0].mxu0
  %v1849 = vpop.f32.mrb[0].mxu0
  %v1850 = vadd.f32 %v266, %v1849
  %v1851 = vpop.f32.mrb[0].mxu0
  %1852 = vmatprep.mubr.bf16.mxu0 0
  %1853 = vmatmul.mubr.bf16.gmra.mrb[0].mxu0 %v820
  %v1854 = vpop.f32.mrb[0].mxu0
  %v1855 = vadd.f32 %v266, %v1854
  %v1856 = vpop.f32.mrb[0].mxu0
  %v1857 = vpop.f32.mrb[0].mxu0
  %v1858 = vadd.f32 %v266, %v1857
  %v1859 = vpop.f32.mrb[0].mxu0
  %1860 = vmatprep.mubr.bf16.mxu0 0
  %1861 = vmatmul.mubr.bf16.gmra.mrb[0].mxu0 %v821
  %v1862 = vpop.f32.mrb[0].mxu0
  %v1863 = vadd.f32 %v266, %v1862
  %v1864 = vpop.f32.mrb[0].mxu0
  %v1865 = vpop.f32.mrb[0].mxu0
  %v1866 = vadd.f32 %v266, %v1865
  %v1867 = vpop.f32.mrb[0].mxu0
  %1868 = vmatprep.mubr.bf16.mxu0 0
  %1869 = vmatmul.mubr.bf16.gmra.mrb[0].mxu0 %v822
  %v1870 = vpop.f32.mrb[0].mxu0
  %v1871 = vadd.f32 %v266, %v1870
  %v1872 = vpop.f32.mrb[0].mxu0
  %v1873 = vpop.f32.mrb[0].mxu0
  %v1874 = vadd.f32 %v266, %v1873
  %v1875 = vpop.f32.mrb[0].mxu0
  %1876 = vmatprep.mubr.bf16.mxu0 0
  %1877 = vmatmul.mubr.bf16.gmra.mrb[0].mxu0 %v823
  %v1878 = vpop.f32.mrb[0].mxu0
  %v1879 = vadd.f32 %v266, %v1878
  %v1880 = vpop.f32.mrb[0].mxu0
  %v1881 = vpop.f32.mrb[0].mxu0
  %v1882 = vadd.f32 %v266, %v1881
  %v1883 = vpop.f32.mrb[0].mxu0
  %1884 = vmatprep.mubr.bf16.mxu0 0
  %1885 = vmatmul.mubr.bf16.gmra.mrb[0].mxu0 %v824
  %v1886 = vpop.f32.mrb[0].mxu0
  %v1887 = vadd.f32 %v266, %v1886
  %v1888 = vpop.f32.mrb[0].mxu0
  %v1889 = vpop.f32.mrb[0].mxu0
  %v1890 = vadd.f32 %v266, %v1889
  %v1891 = vpop.f32.mrb[0].mxu0
  %1892 = vmatprep.mubr.bf16.mxu0 0
  %1893 = vmatmul.mubr.bf16.gmra.mrb[0].mxu0 %v825
  %v1894 = vpop.f32.mrb[0].mxu0
  %v1895 = vadd.f32 %v266, %v1894
  %v1896 = vpop.f32.mrb[0].mxu0
  %v1897 = vpop.f32.mrb[0].mxu0
  %v1898 = vadd.f32 %v266, %v1897
  %v1899 = vpop.f32.mrb[0].mxu0
  %1900 = vmatprep.mubr.bf16.mxu0 0
  %1901 = vmatmul.mubr.bf16.gmra.mrb[0].mxu0 %v826
  %v1902 = vpop.f32.mrb[0].mxu0
  %v1903 = vadd.f32 %v266, %v1902
  %v1904 = vpop.f32.mrb[0].mxu0
  %v1905 = vpop.f32.mrb[0].mxu0
  %v1906 = vadd.f32 %v266, %v1905
  %v1907 = vpop.f32.mrb[0].mxu0
  %1908 = vmatprep.mubr.bf16.mxu0 0
  %1909 = vmatmul.mubr.bf16.gmra.mrb[0].mxu0 %v827
  %v1910 = vpop.f32.mrb[0].mxu0
  %v1911 = vadd.f32 %v266, %v1910
  %v1912 = vpop.f32.mrb[0].mxu0
  %v1913 = vpop.f32.mrb[0].mxu0
  %v1914 = vadd.f32 %v266, %v1913
  %v1915 = vpop.f32.mrb[0].mxu0
  %1916 = vdwg.mxu0
  %v1917 = vmax.f32 %v1023, 0.0
  %v1918 = vmax.f32 %v1026, 0.0
  %v1919 = vmax.f32 %v1031, 0.0
  %v1920 = vmax.f32 %v1034, 0.0
  %v1921 = vmax.f32 %v1039, 0.0
  %v1922 = vmax.f32 %v1042, 0.0
  %v1923 = vmax.f32 %v1047, 0.0
  %v1924 = vmax.f32 %v1050, 0.0
  %v1925 = vmax.f32 %v1055, 0.0
  %v1926 = vmax.f32 %v1058, 0.0
  %v1927 = vmax.f32 %v1063, 0.0
  %v1928 = vmax.f32 %v1066, 0.0
  %v1929 = vmax.f32 %v1071, 0.0
  %v1930 = vmax.f32 %v1074, 0.0
  %v1931 = vmax.f32 %v1079, 0.0
  %v1932 = vmax.f32 %v1082, 0.0
  %v1933 = vmax.f32 %v1087, 0.0
  %v1934 = vmax.f32 %v1090, 0.0
  %v1935 = vmax.f32 %v1095, 0.0
  %v1936 = vmax.f32 %v1098, 0.0
  %v1937 = vmax.f32 %v1103, 0.0
  %v1938 = vmax.f32 %v1106, 0.0
  %v1939 = vmax.f32 %v1111, 0.0
  %v1940 = vmax.f32 %v1114, 0.0
  %v1941 = vmax.f32 %v1119, 0.0
  %v1942 = vmax.f32 %v1122, 0.0
  %v1943 = vmax.f32 %v1127, 0.0
  %v1944 = vmax.f32 %v1130, 0.0
  %v1945 = vmax.f32 %v1135, 0.0
  %v1946 = vmax.f32 %v1138, 0.0
  %v1947 = vmax.f32 %v1143, 0.0
  %v1948 = vmax.f32 %v1146, 0.0
  %v1949 = vmax.f32 %v1151, 0.0
  %v1950 = vmax.f32 %v1154, 0.0
  %v1951 = vmax.f32 %v1159, 0.0
  %v1952 = vmax.f32 %v1162, 0.0
  %v1953 = vmax.f32 %v1167, 0.0
  %v1954 = vmax.f32 %v1170, 0.0
  %v1955 = vmax.f32 %v1175, 0.0
  %v1956 = vmax.f32 %v1178, 0.0
  %v1957 = vmax.f32 %v1183, 0.0
  %v1958 = vmax.f32 %v1186, 0.0
  %v1959 = vmax.f32 %v1191, 0.0
  %v1960 = vmax.f32 %v1194, 0.0
  %v1961 = vmax.f32 %v1199, 0.0
  %v1962 = vmax.f32 %v1202, 0.0
  %v1963 = vmax.f32 %v1207, 0.0
  %v1964 = vmax.f32 %v1210, 0.0
  %v1965 = vmax.f32 %v1215, 0.0
  %v1966 = vmax.f32 %v1218, 0.0
  %v1967 = vmax.f32 %v1223, 0.0
  %v1968 = vmax.f32 %v1226, 0.0
  %v1969 = vmax.f32 %v1231, 0.0
  %v1970 = vmax.f32 %v1234, 0.0
  %v1971 = vmax.f32 %v1239, 0.0
  %v1972 = vmax.f32 %v1242, 0.0
  %v1973 = vmax.f32 %v1247, 0.0
  %v1974 = vmax.f32 %v1250, 0.0
  %v1975 = vmax.f32 %v1255, 0.0
  %v1976 = vmax.f32 %v1258, 0.0
  %v1977 = vmax.f32 %v1263, 0.0
  %v1978 = vmax.f32 %v1266, 0.0
  %v1979 = vmax.f32 %v1271, 0.0
  %v1980 = vmax.f32 %v1274, 0.0
  %v1981 = vmax.f32 %v1279, 0.0
  %v1982 = vmax.f32 %v1282, 0.0
  %v1983 = vmax.f32 %v1287, 0.0
  %v1984 = vmax.f32 %v1290, 0.0
  %v1985 = vmax.f32 %v1295, 0.0
  %v1986 = vmax.f32 %v1298, 0.0
  %v1987 = vmax.f32 %v1303, 0.0
  %v1988 = vmax.f32 %v1306, 0.0
  %v1989 = vmax.f32 %v1311, 0.0
  %v1990 = vmax.f32 %v1314, 0.0
  %v1991 = vmax.f32 %v1319, 0.0
  %v1992 = vmax.f32 %v1322, 0.0
  %v1993 = vmax.f32 %v1327, 0.0
  %v1994 = vmax.f32 %v1330, 0.0
  %v1995 = vmax.f32 %v1335, 0.0
  %v1996 = vmax.f32 %v1338, 0.0
  %v1997 = vmax.f32 %v1343, 0.0
  %v1998 = vmax.f32 %v1346, 0.0
  %v1999 = vmax.f32 %v1351, 0.0
  %v2000 = vmax.f32 %v1354, 0.0
  %v2001 = vmax.f32 %v1359, 0.0
  %v2002 = vmax.f32 %v1362, 0.0
  %v2003 = vmax.f32 %v1367, 0.0
  %v2004 = vmax.f32 %v1370, 0.0
  %v2005 = vmax.f32 %v1375, 0.0
  %v2006 = vmax.f32 %v1378, 0.0
  %v2007 = vmax.f32 %v1383, 0.0
  %v2008 = vmax.f32 %v1386, 0.0
  %v2009 = vmax.f32 %v1391, 0.0
  %v2010 = vmax.f32 %v1394, 0.0
  %v2011 = vmax.f32 %v1399, 0.0
  %v2012 = vmax.f32 %v1402, 0.0
  %v2013 = vmax.f32 %v1407, 0.0
  %v2014 = vmax.f32 %v1410, 0.0
  %v2015 = vmax.f32 %v1415, 0.0
  %v2016 = vmax.f32 %v1418, 0.0
  %v2017 = vmax.f32 %v1423, 0.0
  %v2018 = vmax.f32 %v1426, 0.0
  %v2019 = vmax.f32 %v1431, 0.0
  %v2020 = vmax.f32 %v1434, 0.0
  %v2021 = vmax.f32 %v1439, 0.0
  %v2022 = vmax.f32 %v1442, 0.0
  %v2023 = vmax.f32 %v1447, 0.0
  %v2024 = vmax.f32 %v1450, 0.0
  %v2025 = vmax.f32 %v1455, 0.0
  %v2026 = vmax.f32 %v1458, 0.0
  %v2027 = vmax.f32 %v1463, 0.0
  %v2028 = vmax.f32 %v1466, 0.0
  %v2029 = vmax.f32 %v1471, 0.0
  %v2030 = vmax.f32 %v1474, 0.0
  %v2031 = vmax.f32 %v1479, 0.0
  %v2032 = vmax.f32 %v1482, 0.0
  %v2033 = vmax.f32 %v1487, 0.0
  %v2034 = vmax.f32 %v1490, 0.0
  %v2035 = vmax.f32 %v1495, 0.0
  %v2036 = vmax.f32 %v1498, 0.0
  %v2037 = vmax.f32 %v1503, 0.0
  %v2038 = vmax.f32 %v1506, 0.0
  %v2039 = vmax.f32 %v1511, 0.0
  %v2040 = vmax.f32 %v1514, 0.0
  %v2041 = vmax.f32 %v1519, 0.0
  %v2042 = vmax.f32 %v1522, 0.0
  %v2043 = vmax.f32 %v1527, 0.0
  %v2044 = vmax.f32 %v1530, 0.0
  %v2045 = vmax.f32 %v1535, 0.0
  %v2046 = vmax.f32 %v1538, 0.0
  %v2047 = vmax.f32 %v1543, 0.0
  %v2048 = vmax.f32 %v1546, 0.0
  %v2049 = vmax.f32 %v1551, 0.0
  %v2050 = vmax.f32 %v1554, 0.0
  %v2051 = vmax.f32 %v1559, 0.0
  %v2052 = vmax.f32 %v1562, 0.0
  %v2053 = vmax.f32 %v1567, 0.0
  %v2054 = vmax.f32 %v1570, 0.0
  %v2055 = vmax.f32 %v1575, 0.0
  %v2056 = vmax.f32 %v1578, 0.0
  %v2057 = vmax.f32 %v1583, 0.0
  %v2058 = vmax.f32 %v1586, 0.0
  %v2059 = vmax.f32 %v1591, 0.0
  %v2060 = vmax.f32 %v1594, 0.0
  %v2061 = vmax.f32 %v1599, 0.0
  %v2062 = vmax.f32 %v1602, 0.0
  %v2063 = vmax.f32 %v1607, 0.0
  %v2064 = vmax.f32 %v1610, 0.0
  %v2065 = vmax.f32 %v1615, 0.0
  %v2066 = vmax.f32 %v1618, 0.0
  %v2067 = vmax.f32 %v1623, 0.0
  %v2068 = vmax.f32 %v1626, 0.0
  %v2069 = vmax.f32 %v1631, 0.0
  %v2070 = vmax.f32 %v1634, 0.0
  %v2071 = vmax.f32 %v1639, 0.0
  %v2072 = vmax.f32 %v1642, 0.0
  %v2073 = vmax.f32 %v1647, 0.0
  %v2074 = vmax.f32 %v1650, 0.0
  %v2075 = vmax.f32 %v1655, 0.0
  %v2076 = vmax.f32 %v1658, 0.0
  %v2077 = vmax.f32 %v1663, 0.0
  %v2078 = vmax.f32 %v1666, 0.0
  %v2079 = vmax.f32 %v1671, 0.0
  %v2080 = vmax.f32 %v1674, 0.0
  %v2081 = vmax.f32 %v1679, 0.0
  %v2082 = vmax.f32 %v1682, 0.0
  %v2083 = vmax.f32 %v1687, 0.0
  %v2084 = vmax.f32 %v1690, 0.0
  %v2085 = vmax.f32 %v1695, 0.0
  %v2086 = vmax.f32 %v1698, 0.0
  %v2087 = vmax.f32 %v1703, 0.0
  %v2088 = vmax.f32 %v1706, 0.0
  %v2089 = vmax.f32 %v1711, 0.0
  %v2090 = vmax.f32 %v1714, 0.0
  %v2091 = vmax.f32 %v1719, 0.0
  %v2092 = vmax.f32 %v1722, 0.0
  %v2093 = vmax.f32 %v1727, 0.0
  %v2094 = vmax.f32 %v1730, 0.0
  %v2095 = vmax.f32 %v1735, 0.0
  %v2096 = vmax.f32 %v1738, 0.0
  %v2097 = vmax.f32 %v1743, 0.0
  %v2098 = vmax.f32 %v1746, 0.0
  %v2099 = vmax.f32 %v1751, 0.0
  %v2100 = vmax.f32 %v1754, 0.0
  %v2101 = vmax.f32 %v1759, 0.0
  %v2102 = vmax.f32 %v1762, 0.0
  %v2103 = vmax.f32 %v1767, 0.0
  %v2104 = vmax.f32 %v1770, 0.0
  %v2105 = vmax.f32 %v1775, 0.0
  %v2106 = vmax.f32 %v1778, 0.0
  %v2107 = vmax.f32 %v1783, 0.0
  %v2108 = vmax.f32 %v1786, 0.0
  %v2109 = vmax.f32 %v1791, 0.0
  %v2110 = vmax.f32 %v1794, 0.0
  %v2111 = vmax.f32 %v1799, 0.0
  %v2112 = vmax.f32 %v1802, 0.0
  %v2113 = vmax.f32 %v1807, 0.0
  %v2114 = vmax.f32 %v1810, 0.0
  %v2115 = vmax.f32 %v1815, 0.0
  %v2116 = vmax.f32 %v1818, 0.0
  %v2117 = vmax.f32 %v1823, 0.0
  %v2118 = vmax.f32 %v1826, 0.0
  %v2119 = vmax.f32 %v1831, 0.0
  %v2120 = vmax.f32 %v1834, 0.0
  %v2121 = vmax.f32 %v1839, 0.0
  %v2122 = vmax.f32 %v1842, 0.0
  %v2123 = vmax.f32 %v1847, 0.0
  %v2124 = vmax.f32 %v1850, 0.0
  %v2125 = vmax.f32 %v1855, 0.0
  %v2126 = vmax.f32 %v1858, 0.0
  %v2127 = vmax.f32 %v1863, 0.0
  %v2128 = vmax.f32 %v1866, 0.0
  %v2129 = vmax.f32 %v1871, 0.0
  %v2130 = vmax.f32 %v1874, 0.0
  %v2131 = vmax.f32 %v1879, 0.0
  %v2132 = vmax.f32 %v1882, 0.0
  %v2133 = vmax.f32 %v1887, 0.0
  %v2134 = vmax.f32 %v1890, 0.0
  %v2135 = vmax.f32 %v1895, 0.0
  %v2136 = vmax.f32 %v1898, 0.0
  %v2137 = vmax.f32 %v1903, 0.0
  %v2138 = vmax.f32 %v1906, 0.0
  %v2139 = vmax.f32 %v1911, 0.0
  %v2140 = vmax.f32 %v1914, 0.0
  %v2141 = vmax.f32 %v1917, %v1945
  %v2142 = vmax.f32 %v1918, %v1946
  %v2143 = vmax.f32 %v1919, %v1947
  %v2144 = vmax.f32 %v1920, %v1948
  %v2145 = vmax.f32 %v1921, %v1949
  %v2146 = vmax.f32 %v1922, %v1950
  %v2147 = vmax.f32 %v1923, %v1951
  %v2148 = vmax.f32 %v1924, %v1952
  %v2149 = vmax.f32 %v1925, %v1953
  %v2150 = vmax.f32 %v1926, %v1954
  %v2151 = vmax.f32 %v1927, %v1955
  %v2152 = vmax.f32 %v1928, %v1956
  %v2153 = vmax.f32 %v1929, %v1957
  %v2154 = vmax.f32 %v1930, %v1958
  %v2155 = vmax.f32 %v1931, %v1959
  %v2156 = vmax.f32 %v1932, %v1960
  %v2157 = vmax.f32 %v1933, %v1961
  %v2158 = vmax.f32 %v1934, %v1962
  %v2159 = vmax.f32 %v1935, %v1963
  %v2160 = vmax.f32 %v1936, %v1964
  %v2161 = vmax.f32 %v1937, %v1965
  %v2162 = vmax.f32 %v1938, %v1966
  %v2163 = vmax.f32 %v1939, %v1967
  %v2164 = vmax.f32 %v1940, %v1968
  %v2165 = vmax.f32 %v1941, %v1969
  %v2166 = vmax.f32 %v1942, %v1970
  %v2167 = vmax.f32 %v1943, %v1971
  %v2168 = vmax.f32 %v1944, %v1972
  %v2169 = vmax.f32 %v2029, %v2057
  %v2170 = vmax.f32 %v2030, %v2058
  %v2171 = vmax.f32 %v2031, %v2059
  %v2172 = vmax.f32 %v2032, %v2060
  %v2173 = vmax.f32 %v2033, %v2061
  %v2174 = vmax.f32 %v2034, %v2062
  %v2175 = vmax.f32 %v2035, %v2063
  %v2176 = vmax.f32 %v2036, %v2064
  %v2177 = vmax.f32 %v2037, %v2065
  %v2178 = vmax.f32 %v2038, %v2066
  %v2179 = vmax.f32 %v2039, %v2067
  %v2180 = vmax.f32 %v2040, %v2068
  %v2181 = vmax.f32 %v2041, %v2069
  %v2182 = vmax.f32 %v2042, %v2070
  %v2183 = vmax.f32 %v2043, %v2071
  %v2184 = vmax.f32 %v2044, %v2072
  %v2185 = vmax.f32 %v2045, %v2073
  %v2186 = vmax.f32 %v2046, %v2074
  %v2187 = vmax.f32 %v2047, %v2075
  %v2188 = vmax.f32 %v2048, %v2076
  %v2189 = vmax.f32 %v2049, %v2077
  %v2190 = vmax.f32 %v2050, %v2078
  %v2191 = vmax.f32 %v2051, %v2079
  %v2192 = vmax.f32 %v2052, %v2080
  %v2193 = vmax.f32 %v2053, %v2081
  %v2194 = vmax.f32 %v2054, %v2082
  %v2195 = vmax.f32 %v2055, %v2083
  %v2196 = vmax.f32 %v2056, %v2084
  %v2197 = vmax.f32 %v1973, %v2001
  %v2198 = vmax.f32 %v1974, %v2002
  %v2199 = vmax.f32 %v1975, %v2003
  %v2200 = vmax.f32 %v1976, %v2004
  %v2201 = vmax.f32 %v1977, %v2005
  %v2202 = vmax.f32 %v1978, %v2006
  %v2203 = vmax.f32 %v1979, %v2007
  %v2204 = vmax.f32 %v1980, %v2008
  %v2205 = vmax.f32 %v1981, %v2009
  %v2206 = vmax.f32 %v1982, %v2010
  %v2207 = vmax.f32 %v1983, %v2011
  %v2208 = vmax.f32 %v1984, %v2012
  %v2209 = vmax.f32 %v1985, %v2013
  %v2210 = vmax.f32 %v1986, %v2014
  %v2211 = vmax.f32 %v1987, %v2015
  %v2212 = vmax.f32 %v1988, %v2016
  %v2213 = vmax.f32 %v1989, %v2017
  %v2214 = vmax.f32 %v1990, %v2018
  %v2215 = vmax.f32 %v1991, %v2019
  %v2216 = vmax.f32 %v1992, %v2020
  %v2217 = vmax.f32 %v1993, %v2021
  %v2218 = vmax.f32 %v1994, %v2022
  %v2219 = vmax.f32 %v1995, %v2023
  %v2220 = vmax.f32 %v1996, %v2024
  %v2221 = vmax.f32 %v1997, %v2025
  %v2222 = vmax.f32 %v1998, %v2026
  %v2223 = vmax.f32 %v1999, %v2027
  %v2224 = vmax.f32 %v2000, %v2028
  %v2225 = vmax.f32 %v2085, %v2113
  %v2226 = vmax.f32 %v2086, %v2114
  %v2227 = vmax.f32 %v2087, %v2115
  %v2228 = vmax.f32 %v2088, %v2116
  %v2229 = vmax.f32 %v2089, %v2117
  %v2230 = vmax.f32 %v2090, %v2118
  %v2231 = vmax.f32 %v2091, %v2119
  %v2232 = vmax.f32 %v2092, %v2120
  %v2233 = vmax.f32 %v2093, %v2121
  %v2234 = vmax.f32 %v2094, %v2122
  %v2235 = vmax.f32 %v2095, %v2123
  %v2236 = vmax.f32 %v2096, %v2124
  %v2237 = vmax.f32 %v2097, %v2125
  %v2238 = vmax.f32 %v2098, %v2126
  %v2239 = vmax.f32 %v2099, %v2127
  %v2240 = vmax.f32 %v2100, %v2128
  %v2241 = vmax.f32 %v2101, %v2129
  %v2242 = vmax.f32 %v2102, %v2130
  %v2243 = vmax.f32 %v2103, %v2131
  %v2244 = vmax.f32 %v2104, %v2132
  %v2245 = vmax.f32 %v2105, %v2133
  %v2246 = vmax.f32 %v2106, %v2134
  %v2247 = vmax.f32 %v2107, %v2135
  %v2248 = vmax.f32 %v2108, %v2136
  %v2249 = vmax.f32 %v2109, %v2137
  %v2250 = vmax.f32 %v2110, %v2138
  %v2251 = vmax.f32 %v2111, %v2139
  %v2252 = vmax.f32 %v2112, %v2140
  %v2253 = vmax.f32 %v2141, %v2197
  %v2254 = vmax.f32 %v2142, %v2198
  %v2255 = vmax.f32 %v2143, %v2199
  %v2256 = vmax.f32 %v2144, %v2200
  %v2257 = vmax.f32 %v2145, %v2201
  %v2258 = vmax.f32 %v2146, %v2202
  %v2259 = vmax.f32 %v2147, %v2203
  %v2260 = vmax.f32 %v2148, %v2204
  %v2261 = vmax.f32 %v2149, %v2205
  %v2262 = vmax.f32 %v2150, %v2206
  %v2263 = vmax.f32 %v2151, %v2207
  %v2264 = vmax.f32 %v2152, %v2208
  %v2265 = vmax.f32 %v2153, %v2209
  %v2266 = vmax.f32 %v2154, %v2210
  %v2267 = vmax.f32 %v2155, %v2211
  %v2268 = vmax.f32 %v2156, %v2212
  %v2269 = vmax.f32 %v2157, %v2213
  %v2270 = vmax.f32 %v2158, %v2214
  %v2271 = vmax.f32 %v2159, %v2215
  %v2272 = vmax.f32 %v2160, %v2216
  %v2273 = vmax.f32 %v2161, %v2217
  %v2274 = vmax.f32 %v2162, %v2218
  %v2275 = vmax.f32 %v2163, %v2219
  %v2276 = vmax.f32 %v2164, %v2220
  %v2277 = vmax.f32 %v2165, %v2221
  %v2278 = vmax.f32 %v2166, %v2222
  %v2279 = vmax.f32 %v2167, %v2223
  %v2280 = vmax.f32 %v2168, %v2224
  %v2281 = vmax.f32 %v2169, %v2225
  %v2282 = vmax.f32 %v2170, %v2226
  %v2283 = vmax.f32 %v2171, %v2227
  %v2284 = vmax.f32 %v2172, %v2228
  %v2285 = vmax.f32 %v2173, %v2229
  %v2286 = vmax.f32 %v2174, %v2230
  %v2287 = vmax.f32 %v2175, %v2231
  %v2288 = vmax.f32 %v2176, %v2232
  %v2289 = vmax.f32 %v2177, %v2233
  %v2290 = vmax.f32 %v2178, %v2234
  %v2291 = vmax.f32 %v2179, %v2235
  %v2292 = vmax.f32 %v2180, %v2236
  %v2293 = vmax.f32 %v2181, %v2237
  %v2294 = vmax.f32 %v2182, %v2238
  %v2295 = vmax.f32 %v2183, %v2239
  %v2296 = vmax.f32 %v2184, %v2240
  %v2297 = vmax.f32 %v2185, %v2241
  %v2298 = vmax.f32 %v2186, %v2242
  %v2299 = vmax.f32 %v2187, %v2243
  %v2300 = vmax.f32 %v2188, %v2244
  %v2301 = vmax.f32 %v2189, %v2245
  %v2302 = vmax.f32 %v2190, %v2246
  %v2303 = vmax.f32 %v2191, %v2247
  %v2304 = vmax.f32 %v2192, %v2248
  %v2305 = vmax.f32 %v2193, %v2249
  %v2306 = vmax.f32 %v2194, %v2250
  %v2307 = vmax.f32 %v2195, %v2251
  %v2308 = vmax.f32 %v2196, %v2252
  %vm2365 = vcmask 1046528
  %v2366 = vrot.slane %v2253, 1
  %v2367 = vrot.slane %v2254, 1
  %v2368 = vsel %vm2365, %v2366, %v2367
  %v2369 = vrot.slane %v2255, 1
  %v2370 = vrot.slane %v2256, 1
  %v2371 = vsel %vm2365, %v2369, %v2370
  %v2372 = vrot.slane %v2257, 1
  %v2373 = vrot.slane %v2258, 1
  %v2374 = vsel %vm2365, %v2372, %v2373
  %v2375 = vrot.slane %v2259, 1
  %v2376 = vrot.slane %v2260, 1
  %v2377 = vsel %vm2365, %v2375, %v2376
  %v2378 = vrot.slane %v2261, 1
  %v2379 = vrot.slane %v2262, 1
  %v2380 = vsel %vm2365, %v2378, %v2379
  %v2381 = vrot.slane %v2263, 1
  %v2382 = vrot.slane %v2264, 1
  %v2383 = vsel %vm2365, %v2381, %v2382
  %v2384 = vrot.slane %v2265, 1
  %v2385 = vrot.slane %v2266, 1
  %v2386 = vsel %vm2365, %v2384, %v2385
  %v2387 = vrot.slane %v2267, 1
  %v2388 = vrot.slane %v2268, 1
  %v2389 = vsel %vm2365, %v2387, %v2388
  %v2390 = vrot.slane %v2269, 1
  %v2391 = vrot.slane %v2270, 1
  %v2392 = vsel %vm2365, %v2390, %v2391
  %v2393 = vrot.slane %v2271, 1
  %v2394 = vrot.slane %v2272, 1
  %v2395 = vsel %vm2365, %v2393, %v2394
  %v2396 = vrot.slane %v2273, 1
  %v2397 = vrot.slane %v2274, 1
  %v2398 = vsel %vm2365, %v2396, %v2397
  %v2399 = vrot.slane %v2275, 1
  %v2400 = vrot.slane %v2276, 1
  %v2401 = vsel %vm2365, %v2399, %v2400
  %v2402 = vrot.slane %v2277, 1
  %v2403 = vrot.slane %v2278, 1
  %v2404 = vsel %vm2365, %v2402, %v2403
  %v2405 = vrot.slane %v2279, 1
  %v2406 = vrot.slane %v2280, 1
  %v2407 = vsel %vm2365, %v2405, %v2406
  %v2408 = vrot.slane %v2281, 1
  %v2409 = vrot.slane %v2282, 1
  %v2410 = vsel %vm2365, %v2408, %v2409
  %v2411 = vrot.slane %v2283, 1
  %v2412 = vrot.slane %v2284, 1
  %v2413 = vsel %vm2365, %v2411, %v2412
  %v2414 = vrot.slane %v2285, 1
  %v2415 = vrot.slane %v2286, 1
  %v2416 = vsel %vm2365, %v2414, %v2415
  %v2417 = vrot.slane %v2287, 1
  %v2418 = vrot.slane %v2288, 1
  %v2419 = vsel %vm2365, %v2417, %v2418
  %v2420 = vrot.slane %v2289, 1
  %v2421 = vrot.slane %v2290, 1
  %v2422 = vsel %vm2365, %v2420, %v2421
  %v2423 = vrot.slane %v2291, 1
  %v2424 = vrot.slane %v2292, 1
  %v2425 = vsel %vm2365, %v2423, %v2424
  %v2426 = vrot.slane %v2293, 1
  %v2427 = vrot.slane %v2294, 1
  %v2428 = vsel %vm2365, %v2426, %v2427
  %v2429 = vrot.slane %v2295, 1
  %v2430 = vrot.slane %v2296, 1
  %v2431 = vsel %vm2365, %v2429, %v2430
  %v2432 = vrot.slane %v2297, 1
  %v2433 = vrot.slane %v2298, 1
  %v2434 = vsel %vm2365, %v2432, %v2433
  %v2435 = vrot.slane %v2299, 1
  %v2436 = vrot.slane %v2300, 1
  %v2437 = vsel %vm2365, %v2435, %v2436
  %v2438 = vrot.slane %v2301, 1
  %v2439 = vrot.slane %v2302, 1
  %v2440 = vsel %vm2365, %v2438, %v2439
  %v2441 = vrot.slane %v2303, 1
  %v2442 = vrot.slane %v2304, 1
  %v2443 = vsel %vm2365, %v2441, %v2442
  %v2444 = vrot.slane %v2305, 1
  %v2445 = vrot.slane %v2306, 1
  %v2446 = vsel %vm2365, %v2444, %v2445
  %v2447 = vrot.slane %v2307, 1
  %v2448 = vrot.slane %v2308, 1
  %v2449 = vsel %vm2365, %v2447, %v2448
  %vm2506 = vcmask 1045504
  %v2507 = vrot.slane %v2253, 2
  %v2508 = vrot.slane %v2254, 2
  %v2509 = vsel %vm2506, %v2507, %v2508
  %v2510 = vrot.slane %v2255, 2
  %v2511 = vrot.slane %v2256, 2
  %v2512 = vsel %vm2506, %v2510, %v2511
  %v2513 = vrot.slane %v2257, 2
  %v2514 = vrot.slane %v2258, 2
  %v2515 = vsel %vm2506, %v2513, %v2514
  %v2516 = vrot.slane %v2259, 2
  %v2517 = vrot.slane %v2260, 2
  %v2518 = vsel %vm2506, %v2516, %v2517
  %v2519 = vrot.slane %v2261, 2
  %v2520 = vrot.slane %v2262, 2
  %v2521 = vsel %vm2506, %v2519, %v2520
  %v2522 = vrot.slane %v2263, 2
  %v2523 = vrot.slane %v2264, 2
  %v2524 = vsel %vm2506, %v2522, %v2523
  %v2525 = vrot.slane %v2265, 2
  %v2526 = vrot.slane %v2266, 2
  %v2527 = vsel %vm2506, %v2525, %v2526
  %v2528 = vrot.slane %v2267, 2
  %v2529 = vrot.slane %v2268, 2
  %v2530 = vsel %vm2506, %v2528, %v2529
  %v2531 = vrot.slane %v2269, 2
  %v2532 = vrot.slane %v2270, 2
  %v2533 = vsel %vm2506, %v2531, %v2532
  %v2534 = vrot.slane %v2271, 2
  %v2535 = vrot.slane %v2272, 2
  %v2536 = vsel %vm2506, %v2534, %v2535
  %v2537 = vrot.slane %v2273, 2
  %v2538 = vrot.slane %v2274, 2
  %v2539 = vsel %vm2506, %v2537, %v2538
  %v2540 = vrot.slane %v2275, 2
  %v2541 = vrot.slane %v2276, 2
  %v2542 = vsel %vm2506, %v2540, %v2541
  %v2543 = vrot.slane %v2277, 2
  %v2544 = vrot.slane %v2278, 2
  %v2545 = vsel %vm2506, %v2543, %v2544
  %v2546 = vrot.slane %v2279, 2
  %v2547 = vrot.slane %v2280, 2
  %v2548 = vsel %vm2506, %v2546, %v2547
  %v2549 = vrot.slane %v2281, 2
  %v2550 = vrot.slane %v2282, 2
  %v2551 = vsel %vm2506, %v2549, %v2550
  %v2552 = vrot.slane %v2283, 2
  %v2553 = vrot.slane %v2284, 2
  %v2554 = vsel %vm2506, %v2552, %v2553
  %v2555 = vrot.slane %v2285, 2
  %v2556 = vrot.slane %v2286, 2
  %v2557 = vsel %vm2506, %v2555, %v2556
  %v2558 = vrot.slane %v2287, 2
  %v2559 = vrot.slane %v2288, 2
  %v2560 = vsel %vm2506, %v2558, %v2559
  %v2561 = vrot.slane %v2289, 2
  %v2562 = vrot.slane %v2290, 2
  %v2563 = vsel %vm2506, %v2561, %v2562
  %v2564 = vrot.slane %v2291, 2
  %v2565 = vrot.slane %v2292, 2
  %v2566 = vsel %vm2506, %v2564, %v2565
  %v2567 = vrot.slane %v2293, 2
  %v2568 = vrot.slane %v2294, 2
  %v2569 = vsel %vm2506, %v2567, %v2568
  %v2570 = vrot.slane %v2295, 2
  %v2571 = vrot.slane %v2296, 2
  %v2572 = vsel %vm2506, %v2570, %v2571
  %v2573 = vrot.slane %v2297, 2
  %v2574 = vrot.slane %v2298, 2
  %v2575 = vsel %vm2506, %v2573, %v2574
  %v2576 = vrot.slane %v2299, 2
  %v2577 = vrot.slane %v2300, 2
  %v2578 = vsel %vm2506, %v2576, %v2577
  %v2579 = vrot.slane %v2301, 2
  %v2580 = vrot.slane %v2302, 2
  %v2581 = vsel %vm2506, %v2579, %v2580
  %v2582 = vrot.slane %v2303, 2
  %v2583 = vrot.slane %v2304, 2
  %v2584 = vsel %vm2506, %v2582, %v2583
  %v2585 = vrot.slane %v2305, 2
  %v2586 = vrot.slane %v2306, 2
  %v2587 = vsel %vm2506, %v2585, %v2586
  %v2588 = vrot.slane %v2307, 2
  %v2589 = vrot.slane %v2308, 2
  %v2590 = vsel %vm2506, %v2588, %v2589
  %vm2647 = vcmask 1044480
  %v2648 = vrot.slane %v2253, 3
  %v2649 = vrot.slane %v2254, 3
  %v2650 = vsel %vm2647, %v2648, %v2649
  %v2651 = vrot.slane %v2255, 3
  %v2652 = vrot.slane %v2256, 3
  %v2653 = vsel %vm2647, %v2651, %v2652
  %v2654 = vrot.slane %v2257, 3
  %v2655 = vrot.slane %v2258, 3
  %v2656 = vsel %vm2647, %v2654, %v2655
  %v2657 = vrot.slane %v2259, 3
  %v2658 = vrot.slane %v2260, 3
  %v2659 = vsel %vm2647, %v2657, %v2658
  %v2660 = vrot.slane %v2261, 3
  %v2661 = vrot.slane %v2262, 3
  %v2662 = vsel %vm2647, %v2660, %v2661
  %v2663 = vrot.slane %v2263, 3
  %v2664 = vrot.slane %v2264, 3
  %v2665 = vsel %vm2647, %v2663, %v2664
  %v2666 = vrot.slane %v2265, 3
  %v2667 = vrot.slane %v2266, 3
  %v2668 = vsel %vm2647, %v2666, %v2667
  %v2669 = vrot.slane %v2267, 3
  %v2670 = vrot.slane %v2268, 3
  %v2671 = vsel %vm2647, %v2669, %v2670
  %v2672 = vrot.slane %v2269, 3
  %v2673 = vrot.slane %v2270, 3
  %v2674 = vsel %vm2647, %v2672, %v2673
  %v2675 = vrot.slane %v2271, 3
  %v2676 = vrot.slane %v2272, 3
  %v2677 = vsel %vm2647, %v2675, %v2676
  %v2678 = vrot.slane %v2273, 3
  %v2679 = vrot.slane %v2274, 3
  %v2680 = vsel %vm2647, %v2678, %v2679
  %v2681 = vrot.slane %v2275, 3
  %v2682 = vrot.slane %v2276, 3
  %v2683 = vsel %vm2647, %v2681, %v2682
  %v2684 = vrot.slane %v2277, 3
  %v2685 = vrot.slane %v2278, 3
  %v2686 = vsel %vm2647, %v2684, %v2685
  %v2687 = vrot.slane %v2279, 3
  %v2688 = vrot.slane %v2280, 3
  %v2689 = vsel %vm2647, %v2687, %v2688
  %v2690 = vrot.slane %v2281, 3
  %v2691 = vrot.slane %v2282, 3
  %v2692 = vsel %vm2647, %v2690, %v2691
  %v2693 = vrot.slane %v2283, 3
  %v2694 = vrot.slane %v2284, 3
  %v2695 = vsel %vm2647, %v2693, %v2694
  %v2696 = vrot.slane %v2285, 3
  %v2697 = vrot.slane %v2286, 3
  %v2698 = vsel %vm2647, %v2696, %v2697
  %v2699 = vrot.slane %v2287, 3
  %v2700 = vrot.slane %v2288, 3
  %v2701 = vsel %vm2647, %v2699, %v2700
  %v2702 = vrot.slane %v2289, 3
  %v2703 = vrot.slane %v2290, 3
  %v2704 = vsel %vm2647, %v2702, %v2703
  %v2705 = vrot.slane %v2291, 3
  %v2706 = vrot.slane %v2292, 3
  %v2707 = vsel %vm2647, %v2705, %v2706
  %v2708 = vrot.slane %v2293, 3
  %v2709 = vrot.slane %v2294, 3
  %v2710 = vsel %vm2647, %v2708, %v2709
  %v2711 = vrot.slane %v2295, 3
  %v2712 = vrot.slane %v2296, 3
  %v2713 = vsel %vm2647, %v2711, %v2712
  %v2714 = vrot.slane %v2297, 3
  %v2715 = vrot.slane %v2298, 3
  %v2716 = vsel %vm2647, %v2714, %v2715
  %v2717 = vrot.slane %v2299, 3
  %v2718 = vrot.slane %v2300, 3
  %v2719 = vsel %vm2647, %v2717, %v2718
  %v2720 = vrot.slane %v2301, 3
  %v2721 = vrot.slane %v2302, 3
  %v2722 = vsel %vm2647, %v2720, %v2721
  %v2723 = vrot.slane %v2303, 3
  %v2724 = vrot.slane %v2304, 3
  %v2725 = vsel %vm2647, %v2723, %v2724
  %v2726 = vrot.slane %v2305, 3
  %v2727 = vrot.slane %v2306, 3
  %v2728 = vsel %vm2647, %v2726, %v2727
  %v2729 = vrot.slane %v2307, 3
  %v2730 = vrot.slane %v2308, 3
  %v2731 = vsel %vm2647, %v2729, %v2730
  %vm2788 = vcmask 1043456
  %v2789 = vrot.slane %v2253, 4
  %v2790 = vrot.slane %v2254, 4
  %v2791 = vsel %vm2788, %v2789, %v2790
  %v2792 = vrot.slane %v2255, 4
  %v2793 = vrot.slane %v2256, 4
  %v2794 = vsel %vm2788, %v2792, %v2793
  %v2795 = vrot.slane %v2257, 4
  %v2796 = vrot.slane %v2258, 4
  %v2797 = vsel %vm2788, %v2795, %v2796
  %v2798 = vrot.slane %v2259, 4
  %v2799 = vrot.slane %v2260, 4
  %v2800 = vsel %vm2788, %v2798, %v2799
  %v2801 = vrot.slane %v2261, 4
  %v2802 = vrot.slane %v2262, 4
  %v2803 = vsel %vm2788, %v2801, %v2802
  %v2804 = vrot.slane %v2263, 4
  %v2805 = vrot.slane %v2264, 4
  %v2806 = vsel %vm2788, %v2804, %v2805
  %v2807 = vrot.slane %v2265, 4
  %v2808 = vrot.slane %v2266, 4
  %v2809 = vsel %vm2788, %v2807, %v2808
  %v2810 = vrot.slane %v2267, 4
  %v2811 = vrot.slane %v2268, 4
  %v2812 = vsel %vm2788, %v2810, %v2811
  %v2813 = vrot.slane %v2269, 4
  %v2814 = vrot.slane %v2270, 4
  %v2815 = vsel %vm2788, %v2813, %v2814
  %v2816 = vrot.slane %v2271, 4
  %v2817 = vrot.slane %v2272, 4
  %v2818 = vsel %vm2788, %v2816, %v2817
  %v2819 = vrot.slane %v2273, 4
  %v2820 = vrot.slane %v2274, 4
  %v2821 = vsel %vm2788, %v2819, %v2820
  %v2822 = vrot.slane %v2275, 4
  %v2823 = vrot.slane %v2276, 4
  %v2824 = vsel %vm2788, %v2822, %v2823
  %v2825 = vrot.slane %v2277, 4
  %v2826 = vrot.slane %v2278, 4
  %v2827 = vsel %vm2788, %v2825, %v2826
  %v2828 = vrot.slane %v2279, 4
  %v2829 = vrot.slane %v2280, 4
  %v2830 = vsel %vm2788, %v2828, %v2829
  %v2831 = vrot.slane %v2281, 4
  %v2832 = vrot.slane %v2282, 4
  %v2833 = vsel %vm2788, %v2831, %v2832
  %v2834 = vrot.slane %v2283, 4
  %v2835 = vrot.slane %v2284, 4
  %v2836 = vsel %vm2788, %v2834, %v2835
  %v2837 = vrot.slane %v2285, 4
  %v2838 = vrot.slane %v2286, 4
  %v2839 = vsel %vm2788, %v2837, %v2838
  %v2840 = vrot.slane %v2287, 4
  %v2841 = vrot.slane %v2288, 4
  %v2842 = vsel %vm2788, %v2840, %v2841
  %v2843 = vrot.slane %v2289, 4
  %v2844 = vrot.slane %v2290, 4
  %v2845 = vsel %vm2788, %v2843, %v2844
  %v2846 = vrot.slane %v2291, 4
  %v2847 = vrot.slane %v2292, 4
  %v2848 = vsel %vm2788, %v2846, %v2847
  %v2849 = vrot.slane %v2293, 4
  %v2850 = vrot.slane %v2294, 4
  %v2851 = vsel %vm2788, %v2849, %v2850
  %v2852 = vrot.slane %v2295, 4
  %v2853 = vrot.slane %v2296, 4
  %v2854 = vsel %vm2788, %v2852, %v2853
  %v2855 = vrot.slane %v2297, 4
  %v2856 = vrot.slane %v2298, 4
  %v2857 = vsel %vm2788, %v2855, %v2856
  %v2858 = vrot.slane %v2299, 4
  %v2859 = vrot.slane %v2300, 4
  %v2860 = vsel %vm2788, %v2858, %v2859
  %v2861 = vrot.slane %v2301, 4
  %v2862 = vrot.slane %v2302, 4
  %v2863 = vsel %vm2788, %v2861, %v2862
  %v2864 = vrot.slane %v2303, 4
  %v2865 = vrot.slane %v2304, 4
  %v2866 = vsel %vm2788, %v2864, %v2865
  %v2867 = vrot.slane %v2305, 4
  %v2868 = vrot.slane %v2306, 4
  %v2869 = vsel %vm2788, %v2867, %v2868
  %v2870 = vrot.slane %v2307, 4
  %v2871 = vrot.slane %v2308, 4
  %v2872 = vsel %vm2788, %v2870, %v2871
  %v2929 = vpack.c.bf16 %v2254, %v2253
  %v2930 = vpack.c.bf16 %v2367, %v2368
  %v2931 = vpack.c.bf16 %v2508, %v2509
  %v2932 = vpack.c.bf16 %v2649, %v2650
  %v2933 = vpack.c.bf16 %v2790, %v2791
  %v2934 = vpack.c.bf16 %v2256, %v2255
  %v2935 = vpack.c.bf16 %v2370, %v2371
  %v2936 = vpack.c.bf16 %v2511, %v2512
  %v2937 = vpack.c.bf16 %v2652, %v2653
  %v2938 = vpack.c.bf16 %v2793, %v2794
  %v2939 = vpack.c.bf16 %v2258, %v2257
  %v2940 = vpack.c.bf16 %v2373, %v2374
  %v2941 = vpack.c.bf16 %v2514, %v2515
  %v2942 = vpack.c.bf16 %v2655, %v2656
  %v2943 = vpack.c.bf16 %v2796, %v2797
  %v2944 = vpack.c.bf16 %v2260, %v2259
  %v2945 = vpack.c.bf16 %v2376, %v2377
  %v2946 = vpack.c.bf16 %v2517, %v2518
  %v2947 = vpack.c.bf16 %v2658, %v2659
  %v2948 = vpack.c.bf16 %v2799, %v2800
  %v2949 = vpack.c.bf16 %v2262, %v2261
  %v2950 = vpack.c.bf16 %v2379, %v2380
  %v2951 = vpack.c.bf16 %v2520, %v2521
  %v2952 = vpack.c.bf16 %v2661, %v2662
  %v2953 = vpack.c.bf16 %v2802, %v2803
  %v2954 = vpack.c.bf16 %v2264, %v2263
  %v2955 = vpack.c.bf16 %v2382, %v2383
  %v2956 = vpack.c.bf16 %v2523, %v2524
  %v2957 = vpack.c.bf16 %v2664, %v2665
  %v2958 = vpack.c.bf16 %v2805, %v2806
  %v2959 = vpack.c.bf16 %v2266, %v2265
  %v2960 = vpack.c.bf16 %v2385, %v2386
  %v2961 = vpack.c.bf16 %v2526, %v2527
  %v2962 = vpack.c.bf16 %v2667, %v2668
  %v2963 = vpack.c.bf16 %v2808, %v2809
  %v2964 = vpack.c.bf16 %v2268, %v2267
  %v2965 = vpack.c.bf16 %v2388, %v2389
  %v2966 = vpack.c.bf16 %v2529, %v2530
  %v2967 = vpack.c.bf16 %v2670, %v2671
  %v2968 = vpack.c.bf16 %v2811, %v2812
  %v2969 = vpack.c.bf16 %v2270, %v2269
  %v2970 = vpack.c.bf16 %v2391, %v2392
  %v2971 = vpack.c.bf16 %v2532, %v2533
  %v2972 = vpack.c.bf16 %v2673, %v2674
  %v2973 = vpack.c.bf16 %v2814, %v2815
  %v2974 = vpack.c.bf16 %v2272, %v2271
  %v2975 = vpack.c.bf16 %v2394, %v2395
  %v2976 = vpack.c.bf16 %v2535, %v2536
  %v2977 = vpack.c.bf16 %v2676, %v2677
  %v2978 = vpack.c.bf16 %v2817, %v2818
  %v2979 = vpack.c.bf16 %v2274, %v2273
  %v2980 = vpack.c.bf16 %v2397, %v2398
  %v2981 = vpack.c.bf16 %v2538, %v2539
  %v2982 = vpack.c.bf16 %v2679, %v2680
  %v2983 = vpack.c.bf16 %v2820, %v2821
  %v2984 = vpack.c.bf16 %v2276, %v2275
  %v2985 = vpack.c.bf16 %v2400, %v2401
  %v2986 = vpack.c.bf16 %v2541, %v2542
  %v2987 = vpack.c.bf16 %v2682, %v2683
  %v2988 = vpack.c.bf16 %v2823, %v2824
  %v2989 = vpack.c.bf16 %v2278, %v2277
  %v2990 = vpack.c.bf16 %v2403, %v2404
  %v2991 = vpack.c.bf16 %v2544, %v2545
  %v2992 = vpack.c.bf16 %v2685, %v2686
  %v2993 = vpack.c.bf16 %v2826, %v2827
  %v2994 = vpack.c.bf16 %v2280, %v2279
  %v2995 = vpack.c.bf16 %v2406, %v2407
  %v2996 = vpack.c.bf16 %v2547, %v2548
  %v2997 = vpack.c.bf16 %v2688, %v2689
  %v2998 = vpack.c.bf16 %v2829, %v2830
  %v2999 = vpack.c.bf16 %v2282, %v2281
  %v3000 = vpack.c.bf16 %v2409, %v2410
  %v3001 = vpack.c.bf16 %v2550, %v2551
  %v3002 = vpack.c.bf16 %v2691, %v2692
  %v3003 = vpack.c.bf16 %v2832, %v2833
  %v3004 = vpack.c.bf16 %v2284, %v2283
  %v3005 = vpack.c.bf16 %v2412, %v2413
  %v3006 = vpack.c.bf16 %v2553, %v2554
  %v3007 = vpack.c.bf16 %v2694, %v2695
  %v3008 = vpack.c.bf16 %v2835, %v2836
  %v3009 = vpack.c.bf16 %v2286, %v2285
  %v3010 = vpack.c.bf16 %v2415, %v2416
  %v3011 = vpack.c.bf16 %v2556, %v2557
  %v3012 = vpack.c.bf16 %v2697, %v2698
  %v3013 = vpack.c.bf16 %v2838, %v2839
  %v3014 = vpack.c.bf16 %v2288, %v2287
  %v3015 = vpack.c.bf16 %v2418, %v2419
  %v3016 = vpack.c.bf16 %v2559, %v2560
  %v3017 = vpack.c.bf16 %v2700, %v2701
  %v3018 = vpack.c.bf16 %v2841, %v2842
  %v3019 = vpack.c.bf16 %v2290, %v2289
  %v3020 = vpack.c.bf16 %v2421, %v2422
  %v3021 = vpack.c.bf16 %v2562, %v2563
  %v3022 = vpack.c.bf16 %v2703, %v2704
  %v3023 = vpack.c.bf16 %v2844, %v2845
  %v3024 = vpack.c.bf16 %v2292, %v2291
  %v3025 = vpack.c.bf16 %v2424, %v2425
  %v3026 = vpack.c.bf16 %v2565, %v2566
  %v3027 = vpack.c.bf16 %v2706, %v2707
  %v3028 = vpack.c.bf16 %v2847, %v2848
  %v3029 = vpack.c.bf16 %v2294, %v2293
  %v3030 = vpack.c.bf16 %v2427, %v2428
  %v3031 = vpack.c.bf16 %v2568, %v2569
  %v3032 = vpack.c.bf16 %v2709, %v2710
  %v3033 = vpack.c.bf16 %v2850, %v2851
  %v3034 = vpack.c.bf16 %v2296, %v2295
  %v3035 = vpack.c.bf16 %v2430, %v2431
  %v3036 = vpack.c.bf16 %v2571, %v2572
  %v3037 = vpack.c.bf16 %v2712, %v2713
  %v3038 = vpack.c.bf16 %v2853, %v2854
  %v3039 = vpack.c.bf16 %v2298, %v2297
  %v3040 = vpack.c.bf16 %v2433, %v2434
  %v3041 = vpack.c.bf16 %v2574, %v2575
  %v3042 = vpack.c.bf16 %v2715, %v2716
  %v3043 = vpack.c.bf16 %v2856, %v2857
  %v3044 = vpack.c.bf16 %v2300, %v2299
  %v3045 = vpack.c.bf16 %v2436, %v2437
  %v3046 = vpack.c.bf16 %v2577, %v2578
  %v3047 = vpack.c.bf16 %v2718, %v2719
  %v3048 = vpack.c.bf16 %v2859, %v2860
  %v3049 = vpack.c.bf16 %v2302, %v2301
  %v3050 = vpack.c.bf16 %v2439, %v2440
  %v3051 = vpack.c.bf16 %v2580, %v2581
  %v3052 = vpack.c.bf16 %v2721, %v2722
  %v3053 = vpack.c.bf16 %v2862, %v2863
  %v3054 = vpack.c.bf16 %v2304, %v2303
  %v3055 = vpack.c.bf16 %v2442, %v2443
  %v3056 = vpack.c.bf16 %v2583, %v2584
  %v3057 = vpack.c.bf16 %v2724, %v2725
  %v3058 = vpack.c.bf16 %v2865, %v2866
  %v3059 = vpack.c.bf16 %v2306, %v2305
  %v3060 = vpack.c.bf16 %v2445, %v2446
  %v3061 = vpack.c.bf16 %v2586, %v2587
  %v3062 = vpack.c.bf16 %v2727, %v2728
  %v3063 = vpack.c.bf16 %v2868, %v2869
  %v3064 = vpack.c.bf16 %v2308, %v2307
  %v3065 = vpack.c.bf16 %v2448, %v2449
  %v3066 = vpack.c.bf16 %v2589, %v2590
  %v3067 = vpack.c.bf16 %v2730, %v2731
  %v3068 = vpack.c.bf16 %v2871, %v2872
  %v3071 = vsel %vm2647, %v2929, 0
  %v3074 = vsel %vm2647, %v2930, 0
  %v3077 = vsel %vm2647, %v2931, 0
  %v3080 = vsel %vm2647, %v2932, 0
  %v3083 = vsel %vm2647, %v2933, 0
  %v3086 = vsel %vm2647, %v2934, 0
  %v3089 = vsel %vm2647, %v2935, 0
  %v3092 = vsel %vm2647, %v2936, 0
  %v3095 = vsel %vm2647, %v2937, 0
  %v3098 = vsel %vm2647, %v2938, 0
  %v3101 = vsel %vm2647, %v2939, 0
  %v3104 = vsel %vm2647, %v2940, 0
  %v3107 = vsel %vm2647, %v2941, 0
  %v3110 = vsel %vm2647, %v2942, 0
  %v3113 = vsel %vm2647, %v2943, 0
  %v3116 = vsel %vm2647, %v2944, 0
  %v3119 = vsel %vm2647, %v2945, 0
  %v3122 = vsel %vm2647, %v2946, 0
  %v3125 = vsel %vm2647, %v2947, 0
  %v3128 = vsel %vm2647, %v2948, 0
  %v3131 = vsel %vm2647, %v2949, 0
  %v3134 = vsel %vm2647, %v2950, 0
  %v3137 = vsel %vm2647, %v2951, 0
  %v3140 = vsel %vm2647, %v2952, 0
  %v3143 = vsel %vm2647, %v2953, 0
  %v3146 = vsel %vm2647, %v2954, 0
  %v3149 = vsel %vm2647, %v2955, 0
  %v3152 = vsel %vm2647, %v2956, 0
  %v3155 = vsel %vm2647, %v2957, 0
  %v3158 = vsel %vm2647, %v2958, 0
  %v3161 = vsel %vm2647, %v2959, 0
  %v3164 = vsel %vm2647, %v2960, 0
  %v3167 = vsel %vm2647, %v2961, 0
  %v3170 = vsel %vm2647, %v2962, 0
  %v3173 = vsel %vm2647, %v2963, 0
  %v3176 = vsel %vm2647, %v2964, 0
  %v3179 = vsel %vm2647, %v2965, 0
  %v3182 = vsel %vm2647, %v2966, 0
  %v3185 = vsel %vm2647, %v2967, 0
  %v3188 = vsel %vm2647, %v2968, 0
  %v3191 = vsel %vm2647, %v2969, 0
  %v3194 = vsel %vm2647, %v2970, 0
  %v3197 = vsel %vm2647, %v2971, 0
  %v3200 = vsel %vm2647, %v2972, 0
  %v3203 = vsel %vm2647, %v2973, 0
  %v3206 = vsel %vm2647, %v2974, 0
  %v3209 = vsel %vm2647, %v2975, 0
  %v3212 = vsel %vm2647, %v2976, 0
  %v3215 = vsel %vm2647, %v2977, 0
  %v3218 = vsel %vm2647, %v2978, 0
  %v3221 = vsel %vm2647, %v2979, 0
  %v3224 = vsel %vm2647, %v2980, 0
  %v3227 = vsel %vm2647, %v2981, 0
  %v3230 = vsel %vm2647, %v2982, 0
  %v3233 = vsel %vm2647, %v2983, 0
  %v3236 = vsel %vm2647, %v2984, 0
  %v3239 = vsel %vm2647, %v2985, 0
  %v3242 = vsel %vm2647, %v2986, 0
  %v3245 = vsel %vm2647, %v2987, 0
  %v3248 = vsel %vm2647, %v2988, 0
  %v3251 = vsel %vm2647, %v2989, 0
  %v3254 = vsel %vm2647, %v2990, 0
  %v3257 = vsel %vm2647, %v2991, 0
  %v3260 = vsel %vm2647, %v2992, 0
  %v3263 = vsel %vm2647, %v2993, 0
  %v3266 = vsel %vm2647, %v2994, 0
  %v3269 = vsel %vm2647, %v2995, 0
  %v3272 = vsel %vm2647, %v2996, 0
  %v3275 = vsel %vm2647, %v2997, 0
  %v3278 = vsel %vm2647, %v2998, 0
  %v3281 = vsel %vm2647, %v2999, 0
  %v3284 = vsel %vm2647, %v3000, 0
  %v3287 = vsel %vm2647, %v3001, 0
  %v3290 = vsel %vm2647, %v3002, 0
  %v3293 = vsel %vm2647, %v3003, 0
  %v3296 = vsel %vm2647, %v3004, 0
  %v3299 = vsel %vm2647, %v3005, 0
  %v3302 = vsel %vm2647, %v3006, 0
  %v3305 = vsel %vm2647, %v3007, 0
  %v3308 = vsel %vm2647, %v3008, 0
  %v3311 = vsel %vm2647, %v3009, 0
  %v3314 = vsel %vm2647, %v3010, 0
  %v3317 = vsel %vm2647, %v3011, 0
  %v3320 = vsel %vm2647, %v3012, 0
  %v3323 = vsel %vm2647, %v3013, 0
  %v3326 = vsel %vm2647, %v3014, 0
  %v3329 = vsel %vm2647, %v3015, 0
  %v3332 = vsel %vm2647, %v3016, 0
  %v3335 = vsel %vm2647, %v3017, 0
  %v3338 = vsel %vm2647, %v3018, 0
  %v3341 = vsel %vm2647, %v3019, 0
  %v3344 = vsel %vm2647, %v3020, 0
  %v3347 = vsel %vm2647, %v3021, 0
  %v3350 = vsel %vm2647, %v3022, 0
  %v3353 = vsel %vm2647, %v3023, 0
  %v3356 = vsel %vm2647, %v3024, 0
  %v3359 = vsel %vm2647, %v3025, 0
  %v3362 = vsel %vm2647, %v3026, 0
  %v3365 = vsel %vm2647, %v3027, 0
  %v3368 = vsel %vm2647, %v3028, 0
  %v3371 = vsel %vm2647, %v3029, 0
  %v3374 = vsel %vm2647, %v3030, 0
  %v3377 = vsel %vm2647, %v3031, 0
  %v3380 = vsel %vm2647, %v3032, 0
  %v3383 = vsel %vm2647, %v3033, 0
  %v3386 = vsel %vm2647, %v3034, 0
  %v3389 = vsel %vm2647, %v3035, 0
  %v3392 = vsel %vm2647, %v3036, 0
  %v3395 = vsel %vm2647, %v3037, 0
  %v3398 = vsel %vm2647, %v3038, 0
  %v3401 = vsel %vm2647, %v3039, 0
  %v3404 = vsel %vm2647, %v3040, 0
  %v3407 = vsel %vm2647, %v3041, 0
  %v3410 = vsel %vm2647, %v3042, 0
  %v3413 = vsel %vm2647, %v3043, 0
  %v3416 = vsel %vm2647, %v3044, 0
  %v3419 = vsel %vm2647, %v3045, 0
  %v3422 = vsel %vm2647, %v3046, 0
  %v3425 = vsel %vm2647, %v3047, 0
  %v3428 = vsel %vm2647, %v3048, 0
  %v3431 = vsel %vm2647, %v3049, 0
  %v3434 = vsel %vm2647, %v3050, 0
  %v3437 = vsel %vm2647, %v3051, 0
  %v3440 = vsel %vm2647, %v3052, 0
  %v3443 = vsel %vm2647, %v3053, 0
  %v3446 = vsel %vm2647, %v3054, 0
  %v3449 = vsel %vm2647, %v3055, 0
  %v3452 = vsel %vm2647, %v3056, 0
  %v3455 = vsel %vm2647, %v3057, 0
  %v3458 = vsel %vm2647, %v3058, 0
  %v3461 = vsel %vm2647, %v3059, 0
  %v3464 = vsel %vm2647, %v3060, 0
  %v3467 = vsel %vm2647, %v3061, 0
  %v3470 = vsel %vm2647, %v3062, 0
  %v3473 = vsel %vm2647, %v3063, 0
  %v3476 = vsel %vm2647, %v3064, 0
  %v3479 = vsel %vm2647, %v3065, 0
  %v3482 = vsel %vm2647, %v3066, 0
  %v3485 = vsel %vm2647, %v3067, 0
  %v3488 = vsel %vm2647, %v3068, 0
  %v3490 = vld [vmem:[%s3] sm:$0xf]
  %v3491 = vld [vmem:[%s3 + $0x4] sm:$0xf]
  %v3492 = vld [vmem:[%s3 + $0x8] sm:$0xf]
  %v3493 = vld [vmem:[%s3 + $0xc] sm:$0xf]
  %v3494 = vld [vmem:[%s3 + $0x10] sm:$0xf]
  %v3495 = vld [vmem:[%s3 + $0x14] sm:$0xf]
  %v3496 = vld [vmem:[%s3 + $0x18] sm:$0xf]
  %v3497 = vld [vmem:[%s3 + $0x1c] sm:$0xf]
  %v3498 = vld [vmem:[%s3 + $0x20] sm:$0xf]
  %v3499 = vld [vmem:[%s3 + $0x24] sm:$0xf]
  %v3500 = vld [vmem:[%s3 + $0x28] sm:$0xf]
  %v3501 = vld [vmem:[%s3 + $0x2c] sm:$0xf]
  %v3502 = vld [vmem:[%s3 + $0x30] sm:$0xf]
  %v3503 = vld [vmem:[%s3 + $0x34] sm:$0xf]
  %v3504 = vld [vmem:[%s3 + $0x38] sm:$0xf]
  %v3505 = vld [vmem:[%s3 + $0x3c] sm:$0xf]
  %v3506 = vld [vmem:[%s3 + $0x40] sm:$0xf]
  %v3507 = vld [vmem:[%s3 + $0x44] sm:$0xf]
  %v3508 = vld [vmem:[%s3 + $0x48] sm:$0xf]
  %v3509 = vld [vmem:[%s3 + $0x4c] sm:$0xf]
  %v3510 = vld [vmem:[%s3 + $0x50] sm:$0xf]
  %v3511 = vld [vmem:[%s3 + $0x54] sm:$0xf]
  %v3512 = vld [vmem:[%s3 + $0x58] sm:$0xf]
  %v3513 = vld [vmem:[%s3 + $0x5c] sm:$0xf]
  %v3514 = vld [vmem:[%s3 + $0x60] sm:$0xf]
  %v3515 = vld [vmem:[%s3 + $0x64] sm:$0xf]
  %v3516 = vld [vmem:[%s3 + $0x68] sm:$0xf]
  %v3517 = vld [vmem:[%s3 + $0x6c] sm:$0xf]
  %v3518 = vld [vmem:[%s3 + $0x70] sm:$0xf]
  %v3519 = vld [vmem:[%s3 + $0x74] sm:$0xf]
  %v3520 = vld [vmem:[%s3 + $0x78] sm:$0xf]
  %v3521 = vld [vmem:[%s3 + $0x7c] sm:$0xf]
  %v3522 = vld [vmem:[%s3 + $0x80] sm:$0xf]
  %v3523 = vld [vmem:[%s3 + $0x84] sm:$0xf]
  %v3524 = vld [vmem:[%s3 + $0x88] sm:$0xf]
  %v3525 = vld [vmem:[%s3 + $0x8c] sm:$0xf]
  %v3526 = vld [vmem:[%s3 + $0x90] sm:$0xf]
  %v3527 = vld [vmem:[%s3 + $0x94] sm:$0xf]
  %v3528 = vld [vmem:[%s3 + $0x98] sm:$0xf]
  %v3529 = vld [vmem:[%s3 + $0x9c] sm:$0xf]
  %v3530 = vld [vmem:[%s3 + $0xa0] sm:$0xf]
  %v3531 = vld [vmem:[%s3 + $0xa4] sm:$0xf]
  %v3532 = vld [vmem:[%s3 + $0xa8] sm:$0xf]
  %v3533 = vld [vmem:[%s3 + $0xac] sm:$0xf]
  %v3534 = vld [vmem:[%s3 + $0xb0] sm:$0xf]
  %v3535 = vld [vmem:[%s3 + $0xb4] sm:$0xf]
  %v3536 = vld [vmem:[%s3 + $0xb8] sm:$0xf]
  %v3537 = vld [vmem:[%s3 + $0xbc] sm:$0xf]
  %v3538 = vld [vmem:[%s3 + $0xc0] sm:$0xf]
  %v3539 = vld [vmem:[%s3 + $0xc4] sm:$0xf]
  %v3540 = vld [vmem:[%s3 + $0xc8] sm:$0xf]
  %v3541 = vld [vmem:[%s3 + $0xcc] sm:$0xf]
  %v3542 = vld [vmem:[%s3 + $0xd0] sm:$0xf]
  %v3543 = vld [vmem:[%s3 + $0xd4] sm:$0xf]
  %v3544 = vld [vmem:[%s3 + $0xd8] sm:$0xf]
  %v3545 = vld [vmem:[%s3 + $0xdc] sm:$0xf]
  %v3546 = vld [vmem:[%s3 + $0xe0] sm:$0xf]
  %v3547 = vld [vmem:[%s3 + $0xe4] sm:$0xf]
  %v3548 = vld [vmem:[%s3 + $0xe8] sm:$0xf]
  %v3549 = vld [vmem:[%s3 + $0xec] sm:$0xf]
  %v3550 = vld [vmem:[%s3 + $0xf0] sm:$0xf]
  %v3551 = vld [vmem:[%s3 + $0xf4] sm:$0xf]
  %v3552 = vld [vmem:[%s3 + $0xf8] sm:$0xf]
  %v3553 = vld [vmem:[%s3 + $0xfc] sm:$0xf]
  %v3554 = vld [vmem:[%s3 + $0x100] sm:$0xf]
  %v3555 = vld [vmem:[%s3 + $0x104] sm:$0xf]
  %v3556 = vld [vmem:[%s3 + $0x108] sm:$0xf]
  %v3557 = vld [vmem:[%s3 + $0x10c] sm:$0xf]
  %v3558 = vld [vmem:[%s3 + $0x110] sm:$0xf]
  %v3559 = vld [vmem:[%s3 + $0x114] sm:$0xf]
  %v3560 = vld [vmem:[%s3 + $0x118] sm:$0xf]
  %v3561 = vld [vmem:[%s3 + $0x11c] sm:$0xf]
  %v3562 = vld [vmem:[%s3 + $0x120] sm:$0xf]
  %v3563 = vld [vmem:[%s3 + $0x124] sm:$0xf]
  %v3564 = vld [vmem:[%s3 + $0x128] sm:$0xf]
  %v3565 = vld [vmem:[%s3 + $0x12c] sm:$0xf]
  %v3566 = vld [vmem:[%s3 + $0x130] sm:$0xf]
  %v3567 = vld [vmem:[%s3 + $0x134] sm:$0xf]
  %v3568 = vld [vmem:[%s3 + $0x138] sm:$0xf]
  %v3569 = vld [vmem:[%s3 + $0x13c] sm:$0xf]
  %s3570 = scalar_lea.vmem %s3, 320
  %v3571 = vld [vmem:[%s3570] sm:$0xf]
  %v3572 = vld [vmem:[%s3570 + $0x4] sm:$0xf]
  %v3573 = vld [vmem:[%s3570 + $0x8] sm:$0xf]
  %v3574 = vld [vmem:[%s3570 + $0xc] sm:$0xf]
  %v3575 = vld [vmem:[%s3570 + $0x10] sm:$0xf]
  %v3576 = vld [vmem:[%s3570 + $0x14] sm:$0xf]
  %v3577 = vld [vmem:[%s3570 + $0x18] sm:$0xf]
  %v3578 = vld [vmem:[%s3570 + $0x1c] sm:$0xf]
  %v3579 = vld [vmem:[%s3570 + $0x20] sm:$0xf]
  %v3580 = vld [vmem:[%s3570 + $0x24] sm:$0xf]
  %v3581 = vld [vmem:[%s3570 + $0x28] sm:$0xf]
  %v3582 = vld [vmem:[%s3570 + $0x2c] sm:$0xf]
  %v3583 = vld [vmem:[%s3570 + $0x30] sm:$0xf]
  %v3584 = vld [vmem:[%s3570 + $0x34] sm:$0xf]
  %v3585 = vld [vmem:[%s3570 + $0x38] sm:$0xf]
  %v3586 = vld [vmem:[%s3570 + $0x3c] sm:$0xf]
  %v3587 = vld [vmem:[%s3570 + $0x40] sm:$0xf]
  %v3588 = vld [vmem:[%s3570 + $0x44] sm:$0xf]
  %v3589 = vld [vmem:[%s3570 + $0x48] sm:$0xf]
  %v3590 = vld [vmem:[%s3570 + $0x4c] sm:$0xf]
  %v3591 = vld [vmem:[%s3570 + $0x50] sm:$0xf]
  %v3592 = vld [vmem:[%s3570 + $0x54] sm:$0xf]
  %v3593 = vld [vmem:[%s3570 + $0x58] sm:$0xf]
  %v3594 = vld [vmem:[%s3570 + $0x5c] sm:$0xf]
  %v3595 = vld [vmem:[%s3570 + $0x60] sm:$0xf]
  %v3596 = vld [vmem:[%s3570 + $0x64] sm:$0xf]
  %v3597 = vld [vmem:[%s3570 + $0x68] sm:$0xf]
  %v3598 = vld [vmem:[%s3570 + $0x6c] sm:$0xf]
  %v3599 = vld [vmem:[%s3570 + $0x70] sm:$0xf]
  %v3600 = vld [vmem:[%s3570 + $0x74] sm:$0xf]
  %v3601 = vld [vmem:[%s3570 + $0x78] sm:$0xf]
  %v3602 = vld [vmem:[%s3570 + $0x7c] sm:$0xf]
  %v3603 = vld [vmem:[%s3570 + $0x80] sm:$0xf]
  %v3604 = vld [vmem:[%s3570 + $0x84] sm:$0xf]
  %v3605 = vld [vmem:[%s3570 + $0x88] sm:$0xf]
  %v3606 = vld [vmem:[%s3570 + $0x8c] sm:$0xf]
  %v3607 = vld [vmem:[%s3570 + $0x90] sm:$0xf]
  %v3608 = vld [vmem:[%s3570 + $0x94] sm:$0xf]
  %v3609 = vld [vmem:[%s3570 + $0x98] sm:$0xf]
  %v3610 = vld [vmem:[%s3570 + $0x9c] sm:$0xf]
  %v3611 = vld [vmem:[%s3570 + $0xa0] sm:$0xf]
  %v3612 = vld [vmem:[%s3570 + $0xa4] sm:$0xf]
  %v3613 = vld [vmem:[%s3570 + $0xa8] sm:$0xf]
  %v3614 = vld [vmem:[%s3570 + $0xac] sm:$0xf]
  %v3615 = vld [vmem:[%s3570 + $0xb0] sm:$0xf]
  %v3616 = vld [vmem:[%s3570 + $0xb4] sm:$0xf]
  %v3617 = vld [vmem:[%s3570 + $0xb8] sm:$0xf]
  %v3618 = vld [vmem:[%s3570 + $0xbc] sm:$0xf]
  %v3619 = vld [vmem:[%s3570 + $0xc0] sm:$0xf]
  %v3620 = vld [vmem:[%s3570 + $0xc4] sm:$0xf]
  %v3621 = vld [vmem:[%s3570 + $0xc8] sm:$0xf]
  %v3622 = vld [vmem:[%s3570 + $0xcc] sm:$0xf]
  %v3623 = vld [vmem:[%s3570 + $0xd0] sm:$0xf]
  %v3624 = vld [vmem:[%s3570 + $0xd4] sm:$0xf]
  %v3625 = vld [vmem:[%s3570 + $0xd8] sm:$0xf]
  %v3626 = vld [vmem:[%s3570 + $0xdc] sm:$0xf]
  %v3627 = vld [vmem:[%s3570 + $0xe0] sm:$0xf]
  %v3628 = vld [vmem:[%s3570 + $0xe4] sm:$0xf]
  %v3629 = vld [vmem:[%s3570 + $0xe8] sm:$0xf]
  %v3630 = vld [vmem:[%s3570 + $0xec] sm:$0xf]
  %v3631 = vld [vmem:[%s3570 + $0xf0] sm:$0xf]
  %v3632 = vld [vmem:[%s3570 + $0xf4] sm:$0xf]
  %v3633 = vld [vmem:[%s3570 + $0xf8] sm:$0xf]
  %v3634 = vld [vmem:[%s3570 + $0xfc] sm:$0xf]
  %v3635 = vld [vmem:[%s3570 + $0x100] sm:$0xf]
  %v3636 = vld [vmem:[%s3570 + $0x104] sm:$0xf]
  %v3637 = vld [vmem:[%s3570 + $0x108] sm:$0xf]
  %v3638 = vld [vmem:[%s3570 + $0x10c] sm:$0xf]
  %v3639 = vld [vmem:[%s3570 + $0x110] sm:$0xf]
  %v3640 = vld [vmem:[%s3570 + $0x114] sm:$0xf]
  %v3641 = vld [vmem:[%s3570 + $0x118] sm:$0xf]
  %v3642 = vld [vmem:[%s3570 + $0x11c] sm:$0xf]
  %v3643 = vld [vmem:[%s3570 + $0x120] sm:$0xf]
  %v3644 = vld [vmem:[%s3570 + $0x124] sm:$0xf]
  %v3645 = vld [vmem:[%s3570 + $0x128] sm:$0xf]
  %v3646 = vld [vmem:[%s3570 + $0x12c] sm:$0xf]
  %v3647 = vld [vmem:[%s3570 + $0x130] sm:$0xf]
  %v3648 = vld [vmem:[%s3570 + $0x134] sm:$0xf]
  %v3649 = vld [vmem:[%s3570 + $0x138] sm:$0xf]
  %v3650 = vld [vmem:[%s3570 + $0x13c] sm:$0xf]
  %v3731 = vunpack.c.l.b16 %v3571
  %v3732 = vunpack.c.l.b16 %v3572
  %v3733 = vunpack.c.l.b16 %v3573
  %v3734 = vunpack.c.l.b16 %v3574
  %v3735 = vunpack.c.l.b16 %v3575
  %v3736 = vunpack.c.l.b16 %v3576
  %v3737 = vunpack.c.l.b16 %v3577
  %v3738 = vunpack.c.l.b16 %v3578
  %v3739 = vunpack.c.l.b16 %v3579
  %v3740 = vunpack.c.l.b16 %v3580
  %v3741 = vunpack.c.l.b16 %v3581
  %v3742 = vunpack.c.l.b16 %v3582
  %v3743 = vunpack.c.l.b16 %v3583
  %v3744 = vunpack.c.l.b16 %v3584
  %v3745 = vunpack.c.l.b16 %v3585
  %v3746 = vunpack.c.l.b16 %v3586
  %v3747 = vunpack.c.l.b16 %v3587
  %v3748 = vunpack.c.l.b16 %v3588
  %v3749 = vunpack.c.l.b16 %v3589
  %v3750 = vunpack.c.l.b16 %v3590
  %v3751 = vunpack.c.l.b16 %v3591
  %v3752 = vunpack.c.l.b16 %v3592
  %v3753 = vunpack.c.l.b16 %v3593
  %v3754 = vunpack.c.l.b16 %v3594
  %v3755 = vunpack.c.l.b16 %v3595
  %v3756 = vunpack.c.l.b16 %v3596
  %v3757 = vunpack.c.l.b16 %v3597
  %v3758 = vunpack.c.l.b16 %v3598
  %v3759 = vunpack.c.l.b16 %v3599
  %v3760 = vunpack.c.l.b16 %v3600
  %v3761 = vunpack.c.l.b16 %v3601
  %v3762 = vunpack.c.l.b16 %v3602
  %v3763 = vunpack.c.l.b16 %v3603
  %v3764 = vunpack.c.l.b16 %v3604
  %v3765 = vunpack.c.l.b16 %v3605
  %v3766 = vunpack.c.l.b16 %v3606
  %v3767 = vunpack.c.l.b16 %v3607
  %v3768 = vunpack.c.l.b16 %v3608
  %v3769 = vunpack.c.l.b16 %v3609
  %v3770 = vunpack.c.l.b16 %v3610
  %v3771 = vunpack.c.l.b16 %v3611
  %v3772 = vunpack.c.l.b16 %v3612
  %v3773 = vunpack.c.l.b16 %v3613
  %v3774 = vunpack.c.l.b16 %v3614
  %v3775 = vunpack.c.l.b16 %v3615
  %v3776 = vunpack.c.l.b16 %v3616
  %v3777 = vunpack.c.l.b16 %v3617
  %v3778 = vunpack.c.l.b16 %v3618
  %v3779 = vunpack.c.l.b16 %v3619
  %v3780 = vunpack.c.l.b16 %v3620
  %v3781 = vunpack.c.l.b16 %v3621
  %v3782 = vunpack.c.l.b16 %v3622
  %v3783 = vunpack.c.l.b16 %v3623
  %v3784 = vunpack.c.l.b16 %v3624
  %v3785 = vunpack.c.l.b16 %v3625
  %v3786 = vunpack.c.l.b16 %v3626
  %v3787 = vunpack.c.l.b16 %v3627
  %v3788 = vunpack.c.l.b16 %v3628
  %v3789 = vunpack.c.l.b16 %v3629
  %v3790 = vunpack.c.l.b16 %v3630
  %v3791 = vunpack.c.l.b16 %v3631
  %v3792 = vunpack.c.l.b16 %v3632
  %v3793 = vunpack.c.l.b16 %v3633
  %v3794 = vunpack.c.l.b16 %v3634
  %v3795 = vunpack.c.l.b16 %v3635
  %v3796 = vunpack.c.l.b16 %v3636
  %v3797 = vunpack.c.l.b16 %v3637
  %v3798 = vunpack.c.l.b16 %v3638
  %v3799 = vunpack.c.l.b16 %v3639
  %v3800 = vunpack.c.l.b16 %v3640
  %v3801 = vunpack.c.l.b16 %v3641
  %v3802 = vunpack.c.l.b16 %v3642
  %v3803 = vunpack.c.l.b16 %v3643
  %v3804 = vunpack.c.l.b16 %v3644
  %v3805 = vunpack.c.l.b16 %v3645
  %v3806 = vunpack.c.l.b16 %v3646
  %v3807 = vunpack.c.l.b16 %v3647
  %v3808 = vunpack.c.l.b16 %v3648
  %v3809 = vunpack.c.l.b16 %v3649
  %v3810 = vunpack.c.l.b16 %v3650
  %v3811 = vpack.c.b16 %v3732, %v3731
  %v3812 = vpack.c.b16 %v3734, %v3733
  %v3813 = vpack.c.b16 %v3736, %v3735
  %v3814 = vpack.c.b16 %v3738, %v3737
  %v3815 = vpack.c.b16 %v3740, %v3739
  %v3816 = vpack.c.b16 %v3742, %v3741
  %v3817 = vpack.c.b16 %v3744, %v3743
  %v3818 = vpack.c.b16 %v3746, %v3745
  %v3819 = vpack.c.b16 %v3748, %v3747
  %v3820 = vpack.c.b16 %v3750, %v3749
  %v3821 = vpack.c.b16 %v3752, %v3751
  %v3822 = vpack.c.b16 %v3754, %v3753
  %v3823 = vpack.c.b16 %v3756, %v3755
  %v3824 = vpack.c.b16 %v3758, %v3757
  %v3825 = vpack.c.b16 %v3760, %v3759
  %v3826 = vpack.c.b16 %v3762, %v3761
  %v3827 = vpack.c.b16 %v3764, %v3763
  %v3828 = vpack.c.b16 %v3766, %v3765
  %v3829 = vpack.c.b16 %v3768, %v3767
  %v3830 = vpack.c.b16 %v3770, %v3769
  %v3831 = vpack.c.b16 %v3772, %v3771
  %v3832 = vpack.c.b16 %v3774, %v3773
  %v3833 = vpack.c.b16 %v3776, %v3775
  %v3834 = vpack.c.b16 %v3778, %v3777
  %v3835 = vpack.c.b16 %v3780, %v3779
  %v3836 = vpack.c.b16 %v3782, %v3781
  %v3837 = vpack.c.b16 %v3784, %v3783
  %v3838 = vpack.c.b16 %v3786, %v3785
  %v3839 = vpack.c.b16 %v3788, %v3787
  %v3840 = vpack.c.b16 %v3790, %v3789
  %v3841 = vpack.c.b16 %v3792, %v3791
  %v3842 = vpack.c.b16 %v3794, %v3793
  %v3843 = vpack.c.b16 %v3796, %v3795
  %v3844 = vpack.c.b16 %v3798, %v3797
  %v3845 = vpack.c.b16 %v3800, %v3799
  %v3846 = vpack.c.b16 %v3802, %v3801
  %v3847 = vpack.c.b16 %v3804, %v3803
  %v3848 = vpack.c.b16 %v3806, %v3805
  %v3849 = vpack.c.b16 %v3808, %v3807
  %v3850 = vpack.c.b16 %v3810, %v3809
  %3891 = vmatprep.subr.bf16.mxu0 0
  %3892 = vmatpush1.bf16.msra.mxu0 %v3811
  %3893 = vmatprep.subr.bf16.mxu0 0
  %3894 = vmatpush1.bf16.msra.mxu0 %v3812
  %3895 = vmatprep.subr.bf16.mxu0 0
  %3896 = vmatpush1.bf16.msra.mxu0 %v3813
  %3897 = vmatprep.subr.bf16.mxu0 0
  %3898 = vmatpush1.bf16.msra.mxu0 %v3814
  %3899 = vmatprep.subr.bf16.mxu0 0
  %3900 = vmatpush1.bf16.msra.mxu0 %v3815
  %3901 = vmatprep.subr.bf16.mxu0 0
  %3902 = vmatpush1.bf16.msra.mxu0 %v3816
  %3903 = vmatprep.subr.bf16.mxu0 0
  %3904 = vmatpush1.bf16.msra.mxu0 %v3817
  %3905 = vmatprep.subr.bf16.mxu0 0
  %3906 = vmatpush1.bf16.msra.mxu0 %v3818
  %3907 = vmatprep.subr.bf16.mxu0 0
  %3908 = vmatpush1.bf16.msra.mxu0 %v3819
  %3909 = vmatprep.subr.bf16.mxu0 0
  %3910 = vmatpush1.bf16.msra.mxu0 %v3820
  %3911 = vmatprep.subr.bf16.mxu0 0
  %3912 = vmatpush1.bf16.msra.mxu0 %v3821
  %3913 = vmatprep.subr.bf16.mxu0 0
  %3914 = vmatpush1.bf16.msra.mxu0 %v3822
  %3915 = vmatprep.subr.bf16.mxu0 0
  %3916 = vmatpush1.bf16.msra.mxu0 %v3823
  %3917 = vmatprep.subr.bf16.mxu0 0
  %3918 = vmatpush1.bf16.msra.mxu0 %v3824
  %3919 = vmatprep.subr.bf16.mxu0 0
  %3920 = vmatpush1.bf16.msra.mxu0 %v3825
  %3921 = vmatprep.subr.bf16.mxu0 0
  %3922 = vmatpush1.bf16.msra.mxu0 %v3826
  %3923 = vmatprep.mubr.bf16.mxu0 %v3089
  %3924 = vmatmul.mubr.bf16.gmra.mrb[0].mxu0 %v3086
  %v3925 = vpop.f32.mrb[0].mxu0
  %v3926 = vadd.f32 0.0, %v3925
  %v3927 = vpop.f32.mrb[0].mxu0
  %v3928 = vpop.f32.mrb[0].mxu0
  %v3929 = vadd.f32 0.0, %v3928
  %v3930 = vpop.f32.mrb[0].mxu0
  %3931 = vmatprep.mubr.bf16.mxu0 %v3104
  %3932 = vmatmul.mubr.bf16.gmra.mrb[0].mxu0 %v3101
  %v3933 = vpop.f32.mrb[0].mxu0
  %v3934 = vadd.f32 0.0, %v3933
  %v3935 = vpop.f32.mrb[0].mxu0
  %v3936 = vpop.f32.mrb[0].mxu0
  %v3937 = vadd.f32 0.0, %v3936
  %v3938 = vpop.f32.mrb[0].mxu0
  %3939 = vmatprep.mubr.bf16.mxu0 %v3119
  %3940 = vmatmul.mubr.bf16.gmra.mrb[0].mxu0 %v3116
  %v3941 = vpop.f32.mrb[0].mxu0
  %v3942 = vadd.f32 0.0, %v3941
  %v3943 = vpop.f32.mrb[0].mxu0
  %v3944 = vpop.f32.mrb[0].mxu0
  %v3945 = vadd.f32 0.0, %v3944
  %v3946 = vpop.f32.mrb[0].mxu0
  %3947 = vmatprep.mubr.bf16.mxu0 %v3134
  %3948 = vmatmul.mubr.bf16.gmra.mrb[0].mxu0 %v3131
  %v3949 = vpop.f32.mrb[0].mxu0
  %v3950 = vadd.f32 0.0, %v3949
  %v3951 = vpop.f32.mrb[0].mxu0
  %v3952 = vpop.f32.mrb[0].mxu0
  %v3953 = vadd.f32 0.0, %v3952
  %v3954 = vpop.f32.mrb[0].mxu0
  %3955 = vmatprep.mubr.bf16.mxu0 %v3149
  %3956 = vmatmul.mubr.bf16.gmra.mrb[0].mxu0 %v3146
  %v3957 = vpop.f32.mrb[0].mxu0
  %v3958 = vadd.f32 0.0, %v3957
  %v3959 = vpop.f32.mrb[0].mxu0
  %v3960 = vpop.f32.mrb[0].mxu0
  %v3961 = vadd.f32 0.0, %v3960
  %v3962 = vpop.f32.mrb[0].mxu0
  %3963 = vmatprep.mubr.bf16.mxu0 %v3164
  %3964 = vmatmul.mubr.bf16.gmra.mrb[0].mxu0 %v3161
  %v3965 = vpop.f32.mrb[0].mxu0
  %v3966 = vadd.f32 0.0, %v3965
  %v3967 = vpop.f32.mrb[0].mxu0
  %v3968 = vpop.f32.mrb[0].mxu0
  %v3969 = vadd.f32 0.0, %v3968
  %v3970 = vpop.f32.mrb[0].mxu0
  %3971 = vmatprep.mubr.bf16.mxu0 %v3179
  %3972 = vmatmul.mubr.bf16.gmra.mrb[0].mxu0 %v3176
  %v3973 = vpop.f32.mrb[0].mxu0
  %v3974 = vadd.f32 0.0, %v3973
  %v3975 = vpop.f32.mrb[0].mxu0
  %v3976 = vpop.f32.mrb[0].mxu0
  %v3977 = vadd.f32 0.0, %v3976
  %v3978 = vpop.f32.mrb[0].mxu0
  %3979 = vmatprep.mubr.bf16.mxu0 %v3194
  %3980 = vmatmul.mubr.bf16.gmra.mrb[0].mxu0 %v3191
  %v3981 = vpop.f32.mrb[0].mxu0
  %v3982 = vadd.f32 0.0, %v3981
  %v3983 = vpop.f32.mrb[0].mxu0
  %v3984 = vpop.f32.mrb[0].mxu0
  %v3985 = vadd.f32 0.0, %v3984
  %v3986 = vpop.f32.mrb[0].mxu0
  %3987 = vmatprep.mubr.bf16.mxu0 %v3209
  %3988 = vmatmul.mubr.bf16.gmra.mrb[0].mxu0 %v3206
  %v3989 = vpop.f32.mrb[0].mxu0
  %v3990 = vadd.f32 0.0, %v3989
  %v3991 = vpop.f32.mrb[0].mxu0
  %v3992 = vpop.f32.mrb[0].mxu0
  %v3993 = vadd.f32 0.0, %v3992
  %v3994 = vpop.f32.mrb[0].mxu0
  %3995 = vmatprep.mubr.bf16.mxu0 %v3224
  %3996 = vmatmul.mubr.bf16.gmra.mrb[0].mxu0 %v3221
  %v3997 = vpop.f32.mrb[0].mxu0
  %v3998 = vadd.f32 0.0, %v3997
  %v3999 = vpop.f32.mrb[0].mxu0
  %v4000 = vpop.f32.mrb[0].mxu0
  %v4001 = vadd.f32 0.0, %v4000
  %v4002 = vpop.f32.mrb[0].mxu0
  %4003 = vmatprep.mubr.bf16.mxu0 %v3299
  %4004 = vmatmul.mubr.bf16.gmra.mrb[0].mxu0 %v3296
  %v4005 = vpop.f32.mrb[0].mxu0
  %v4006 = vadd.f32 0.0, %v4005
  %v4007 = vpop.f32.mrb[0].mxu0
  %v4008 = vpop.f32.mrb[0].mxu0
  %v4009 = vadd.f32 0.0, %v4008
  %v4010 = vpop.f32.mrb[0].mxu0
  %4011 = vmatprep.mubr.bf16.mxu0 %v3314
  %4012 = vmatmul.mubr.bf16.gmra.mrb[0].mxu0 %v3311
  %v4013 = vpop.f32.mrb[0].mxu0
  %v4014 = vadd.f32 0.0, %v4013
  %v4015 = vpop.f32.mrb[0].mxu0
  %v4016 = vpop.f32.mrb[0].mxu0
  %v4017 = vadd.f32 0.0, %v4016
  %v4018 = vpop.f32.mrb[0].mxu0
  %4019 = vmatprep.mubr.bf16.mxu0 %v3329
  %4020 = vmatmul.mubr.bf16.gmra.mrb[0].mxu0 %v3326
  %v4021 = vpop.f32.mrb[0].mxu0
  %v4022 = vadd.f32 0.0, %v4021
  %v4023 = vpop.f32.mrb[0].mxu0
  %v4024 = vpop.f32.mrb[0].mxu0
  %v4025 = vadd.f32 0.0, %v4024
  %v4026 = vpop.f32.mrb[0].mxu0
  %4027 = vmatprep.mubr.bf16.mxu0 %v3344
  %4028 = vmatmul.mubr.bf16.gmra.mrb[0].mxu0 %v3341
  %v4029 = vpop.f32.mrb[0].mxu0
  %v4030 = vadd.f32 0.0, %v4029
  %v4031 = vpop.f32.mrb[0].mxu0
  %v4032 = vpop.f32.mrb[0].mxu0
  %v4033 = vadd.f32 0.0, %v4032
  %v4034 = vpop.f32.mrb[0].mxu0
  %4035 = vmatprep.mubr.bf16.mxu0 %v3359
  %4036 = vmatmul.mubr.bf16.gmra.mrb[0].mxu0 %v3356
  %v4037 = vpop.f32.mrb[0].mxu0
  %v4038 = vadd.f32 0.0, %v4037
  %v4039 = vpop.f32.mrb[0].mxu0
  %v4040 = vpop.f32.mrb[0].mxu0
  %v4041 = vadd.f32 0.0, %v4040
  %v4042 = vpop.f32.mrb[0].mxu0
  %4043 = vmatprep.mubr.bf16.mxu0 %v3374
  %4044 = vmatmul.mubr.bf16.gmra.mrb[0].mxu0 %v3371
  %v4045 = vpop.f32.mrb[0].mxu0
  %v4046 = vadd.f32 0.0, %v4045
  %v4047 = vpop.f32.mrb[0].mxu0
  %v4048 = vpop.f32.mrb[0].mxu0
  %v4049 = vadd.f32 0.0, %v4048
  %v4050 = vpop.f32.mrb[0].mxu0
  %4051 = vmatprep.mubr.bf16.mxu0 %v3389
  %4052 = vmatmul.mubr.bf16.gmra.mrb[0].mxu0 %v3386
  %v4053 = vpop.f32.mrb[0].mxu0
  %v4054 = vadd.f32 0.0, %v4053
  %v4055 = vpop.f32.mrb[0].mxu0
  %v4056 = vpop.f32.mrb[0].mxu0
  %v4057 = vadd.f32 0.0, %v4056
  %v4058 = vpop.f32.mrb[0].mxu0
  %4059 = vmatprep.mubr.bf16.mxu0 %v3404
  %4060 = vmatmul.mubr.bf16.gmra.mrb[0].mxu0 %v3401
  %v4061 = vpop.f32.mrb[0].mxu0
  %v4062 = vadd.f32 0.0, %v4061
  %v4063 = vpop.f32.mrb[0].mxu0
  %v4064 = vpop.f32.mrb[0].mxu0
  %v4065 = vadd.f32 0.0, %v4064
  %v4066 = vpop.f32.mrb[0].mxu0
  %4067 = vmatprep.mubr.bf16.mxu0 %v3419
  %4068 = vmatmul.mubr.bf16.gmra.mrb[0].mxu0 %v3416
  %v4069 = vpop.f32.mrb[0].mxu0
  %v4070 = vadd.f32 0.0, %v4069
  %v4071 = vpop.f32.mrb[0].mxu0
  %v4072 = vpop.f32.mrb[0].mxu0
  %v4073 = vadd.f32 0.0, %v4072
  %v4074 = vpop.f32.mrb[0].mxu0
  %4075 = vmatprep.mubr.bf16.mxu0 %v3434
  %4076 = vmatmul.mubr.bf16.gmra.mrb[0].mxu0 %v3431
  %v4077 = vpop.f32.mrb[0].mxu0
  %v4078 = vadd.f32 0.0, %v4077
  %v4079 = vpop.f32.mrb[0].mxu0
  %v4080 = vpop.f32.mrb[0].mxu0
  %v4081 = vadd.f32 0.0, %v4080
  %v4082 = vpop.f32.mrb[0].mxu0
  %4083 = vdwg.mxu0
  %4084 = vmatprep.subr.bf16.mxu0 0
  %4085 = vmatpush1.bf16.msra.mxu0 %v3827
  %4086 = vmatprep.subr.bf16.mxu0 0
  %4087 = vmatpush1.bf16.msra.mxu0 %v3828
  %4088 = vmatprep.subr.bf16.mxu0 0
  %4089 = vmatpush1.bf16.msra.mxu0 %v3829
  %4090 = vmatprep.subr.bf16.mxu0 0
  %4091 = vmatpush1.bf16.msra.mxu0 %v3830
  %4092 = vmatprep.subr.bf16.mxu0 0
  %4093 = vmatpush1.bf16.msra.mxu0 %v3831
  %4094 = vmatprep.subr.bf16.mxu0 0
  %4095 = vmatpush1.bf16.msra.mxu0 %v3832
  %4096 = vmatprep.subr.bf16.mxu0 0
  %4097 = vmatpush1.bf16.msra.mxu0 %v3833
  %4098 = vmatprep.subr.bf16.mxu0 0
  %4099 = vmatpush1.bf16.msra.mxu0 %v3834
  %4100 = vmatprep.subr.bf16.mxu0 0
  %4101 = vmatpush1.bf16.msra.mxu0 %v3835
  %4102 = vmatprep.subr.bf16.mxu0 0
  %4103 = vmatpush1.bf16.msra.mxu0 %v3836
  %4104 = vmatprep.subr.bf16.mxu0 0
  %4105 = vmatpush1.bf16.msra.mxu0 %v3837
  %4106 = vmatprep.subr.bf16.mxu0 0
  %4107 = vmatpush1.bf16.msra.mxu0 %v3838
  %4108 = vmatprep.subr.bf16.mxu0 0
  %4109 = vmatpush1.bf16.msra.mxu0 %v3839
  %4110 = vmatprep.subr.bf16.mxu0 0
  %4111 = vmatpush1.bf16.msra.mxu0 %v3840
  %4112 = vmatprep.subr.bf16.mxu0 0
  %4113 = vmatpush1.bf16.msra.mxu0 %v3841
  %4114 = vmatprep.subr.bf16.mxu0 0
  %4115 = vmatpush1.bf16.msra.mxu0 %v3842
  %4116 = vmatprep.mubr.bf16.mxu0 %v3095
  %4117 = vmatmul.mubr.bf16.gmra.mrb[0].mxu0 %v3092
  %v4118 = vpop.f32.mrb[0].mxu0
  %v4119 = vadd.f32 %v3926, %v4118
  %v4120 = vpop.f32.mrb[0].mxu0
  %v4121 = vpop.f32.mrb[0].mxu0
  %v4122 = vadd.f32 %v3929, %v4121
  %v4123 = vpop.f32.mrb[0].mxu0
  %4124 = vmatprep.mubr.bf16.mxu0 %v3110
  %4125 = vmatmul.mubr.bf16.gmra.mrb[0].mxu0 %v3107
  %v4126 = vpop.f32.mrb[0].mxu0
  %v4127 = vadd.f32 %v3934, %v4126
  %v4128 = vpop.f32.mrb[0].mxu0
  %v4129 = vpop.f32.mrb[0].mxu0
  %v4130 = vadd.f32 %v3937, %v4129
  %v4131 = vpop.f32.mrb[0].mxu0
  %4132 = vmatprep.mubr.bf16.mxu0 %v3125
  %4133 = vmatmul.mubr.bf16.gmra.mrb[0].mxu0 %v3122
  %v4134 = vpop.f32.mrb[0].mxu0
  %v4135 = vadd.f32 %v3942, %v4134
  %v4136 = vpop.f32.mrb[0].mxu0
  %v4137 = vpop.f32.mrb[0].mxu0
  %v4138 = vadd.f32 %v3945, %v4137
  %v4139 = vpop.f32.mrb[0].mxu0
  %4140 = vmatprep.mubr.bf16.mxu0 %v3140
  %4141 = vmatmul.mubr.bf16.gmra.mrb[0].mxu0 %v3137
  %v4142 = vpop.f32.mrb[0].mxu0
  %v4143 = vadd.f32 %v3950, %v4142
  %v4144 = vpop.f32.mrb[0].mxu0
  %v4145 = vpop.f32.mrb[0].mxu0
  %v4146 = vadd.f32 %v3953, %v4145
  %v4147 = vpop.f32.mrb[0].mxu0
  %4148 = vmatprep.mubr.bf16.mxu0 %v3155
  %4149 = vmatmul.mubr.bf16.gmra.mrb[0].mxu0 %v3152
  %v4150 = vpop.f32.mrb[0].mxu0
  %v4151 = vadd.f32 %v3958, %v4150
  %v4152 = vpop.f32.mrb[0].mxu0
  %v4153 = vpop.f32.mrb[0].mxu0
  %v4154 = vadd.f32 %v3961, %v4153
  %v4155 = vpop.f32.mrb[0].mxu0
  %4156 = vmatprep.mubr.bf16.mxu0 %v3170
  %4157 = vmatmul.mubr.bf16.gmra.mrb[0].mxu0 %v3167
  %v4158 = vpop.f32.mrb[0].mxu0
  %v4159 = vadd.f32 %v3966, %v4158
  %v4160 = vpop.f32.mrb[0].mxu0
  %v4161 = vpop.f32.mrb[0].mxu0
  %v4162 = vadd.f32 %v3969, %v4161
  %v4163 = vpop.f32.mrb[0].mxu0
  %4164 = vmatprep.mubr.bf16.mxu0 %v3185
  %4165 = vmatmul.mubr.bf16.gmra.mrb[0].mxu0 %v3182
  %v4166 = vpop.f32.mrb[0].mxu0
  %v4167 = vadd.f32 %v3974, %v4166
  %v4168 = vpop.f32.mrb[0].mxu0
  %v4169 = vpop.f32.mrb[0].mxu0
  %v4170 = vadd.f32 %v3977, %v4169
  %v4171 = vpop.f32.mrb[0].mxu0
  %4172 = vmatprep.mubr.bf16.mxu0 %v3200
  %4173 = vmatmul.mubr.bf16.gmra.mrb[0].mxu0 %v3197
  %v4174 = vpop.f32.mrb[0].mxu0
  %v4175 = vadd.f32 %v3982, %v4174
  %v4176 = vpop.f32.mrb[0].mxu0
  %v4177 = vpop.f32.mrb[0].mxu0
  %v4178 = vadd.f32 %v3985, %v4177
  %v4179 = vpop.f32.mrb[0].mxu0
  %4180 = vmatprep.mubr.bf16.mxu0 %v3215
  %4181 = vmatmul.mubr.bf16.gmra.mrb[0].mxu0 %v3212
  %v4182 = vpop.f32.mrb[0].mxu0
  %v4183 = vadd.f32 %v3990, %v4182
  %v4184 = vpop.f32.mrb[0].mxu0
  %v4185 = vpop.f32.mrb[0].mxu0
  %v4186 = vadd.f32 %v3993, %v4185
  %v4187 = vpop.f32.mrb[0].mxu0
  %4188 = vmatprep.mubr.bf16.mxu0 %v3230
  %4189 = vmatmul.mubr.bf16.gmra.mrb[0].mxu0 %v3227
  %v4190 = vpop.f32.mrb[0].mxu0
  %v4191 = vadd.f32 %v3998, %v4190
  %v4192 = vpop.f32.mrb[0].mxu0
  %v4193 = vpop.f32.mrb[0].mxu0
  %v4194 = vadd.f32 %v4001, %v4193
  %v4195 = vpop.f32.mrb[0].mxu0
  %4196 = vmatprep.mubr.bf16.mxu0 %v3305
  %4197 = vmatmul.mubr.bf16.gmra.mrb[0].mxu0 %v3302
  %v4198 = vpop.f32.mrb[0].mxu0
  %v4199 = vadd.f32 %v4006, %v4198
  %v4200 = vpop.f32.mrb[0].mxu0
  %v4201 = vpop.f32.mrb[0].mxu0
  %v4202 = vadd.f32 %v4009, %v4201
  %v4203 = vpop.f32.mrb[0].mxu0
  %4204 = vmatprep.mubr.bf16.mxu0 %v3320
  %4205 = vmatmul.mubr.bf16.gmra.mrb[0].mxu0 %v3317
  %v4206 = vpop.f32.mrb[0].mxu0
  %v4207 = vadd.f32 %v4014, %v4206
  %v4208 = vpop.f32.mrb[0].mxu0
  %v4209 = vpop.f32.mrb[0].mxu0
  %v4210 = vadd.f32 %v4017, %v4209
  %v4211 = vpop.f32.mrb[0].mxu0
  %4212 = vmatprep.mubr.bf16.mxu0 %v3335
  %4213 = vmatmul.mubr.bf16.gmra.mrb[0].mxu0 %v3332
  %v4214 = vpop.f32.mrb[0].mxu0
  %v4215 = vadd.f32 %v4022, %v4214
  %v4216 = vpop.f32.mrb[0].mxu0
  %v4217 = vpop.f32.mrb[0].mxu0
  %v4218 = vadd.f32 %v4025, %v4217
  %v4219 = vpop.f32.mrb[0].mxu0
  %4220 = vmatprep.mubr.bf16.mxu0 %v3350
  %4221 = vmatmul.mubr.bf16.gmra.mrb[0].mxu0 %v3347
  %v4222 = vpop.f32.mrb[0].mxu0
  %v4223 = vadd.f32 %v4030, %v4222
  %v4224 = vpop.f32.mrb[0].mxu0
  %v4225 = vpop.f32.mrb[0].mxu0
  %v4226 = vadd.f32 %v4033, %v4225
  %v4227 = vpop.f32.mrb[0].mxu0
  %4228 = vmatprep.mubr.bf16.mxu0 %v3365
  %4229 = vmatmul.mubr.bf16.gmra.mrb[0].mxu0 %v3362
  %v4230 = vpop.f32.mrb[0].mxu0
  %v4231 = vadd.f32 %v4038, %v4230
  %v4232 = vpop.f32.mrb[0].mxu0
  %v4233 = vpop.f32.mrb[0].mxu0
  %v4234 = vadd.f32 %v4041, %v4233
  %v4235 = vpop.f32.mrb[0].mxu0
  %4236 = vmatprep.mubr.bf16.mxu0 %v3380
  %4237 = vmatmul.mubr.bf16.gmra.mrb[0].mxu0 %v3377
  %v4238 = vpop.f32.mrb[0].mxu0
  %v4239 = vadd.f32 %v4046, %v4238
  %v4240 = vpop.f32.mrb[0].mxu0
  %v4241 = vpop.f32.mrb[0].mxu0
  %v4242 = vadd.f32 %v4049, %v4241
  %v4243 = vpop.f32.mrb[0].mxu0
  %4244 = vmatprep.mubr.bf16.mxu0 %v3395
  %4245 = vmatmul.mubr.bf16.gmra.mrb[0].mxu0 %v3392
  %v4246 = vpop.f32.mrb[0].mxu0
  %v4247 = vadd.f32 %v4054, %v4246
  %v4248 = vpop.f32.mrb[0].mxu0
  %v4249 = vpop.f32.mrb[0].mxu0
  %v4250 = vadd.f32 %v4057, %v4249
  %v4251 = vpop.f32.mrb[0].mxu0
  %4252 = vmatprep.mubr.bf16.mxu0 %v3410
  %4253 = vmatmul.mubr.bf16.gmra.mrb[0].mxu0 %v3407
  %v4254 = vpop.f32.mrb[0].mxu0
  %v4255 = vadd.f32 %v4062, %v4254
  %v4256 = vpop.f32.mrb[0].mxu0
  %v4257 = vpop.f32.mrb[0].mxu0
  %v4258 = vadd.f32 %v4065, %v4257
  %v4259 = vpop.f32.mrb[0].mxu0
  %4260 = vmatprep.mubr.bf16.mxu0 %v3425
  %4261 = vmatmul.mubr.bf16.gmra.mrb[0].mxu0 %v3422
  %v4262 = vpop.f32.mrb[0].mxu0
  %v4263 = vadd.f32 %v4070, %v4262
  %v4264 = vpop.f32.mrb[0].mxu0
  %v4265 = vpop.f32.mrb[0].mxu0
  %v4266 = vadd.f32 %v4073, %v4265
  %v4267 = vpop.f32.mrb[0].mxu0
  %4268 = vmatprep.mubr.bf16.mxu0 %v3440
  %4269 = vmatmul.mubr.bf16.gmra.mrb[0].mxu0 %v3437
  %v4270 = vpop.f32.mrb[0].mxu0
  %v4271 = vadd.f32 %v4078, %v4270
  %v4272 = vpop.f32.mrb[0].mxu0
  %v4273 = vpop.f32.mrb[0].mxu0
  %v4274 = vadd.f32 %v4081, %v4273
  %v4275 = vpop.f32.mrb[0].mxu0
  %4276 = vdwg.mxu0
  %4277 = vmatprep.subr.bf16.mxu0 0
  %4278 = vmatpush1.bf16.msra.mxu0 %v3843
  %4279 = vmatprep.subr.bf16.mxu0 0
  %4280 = vmatpush1.bf16.msra.mxu0 %v3844
  %4281 = vmatprep.subr.bf16.mxu0 0
  %4282 = vmatpush1.bf16.msra.mxu0 %v3845
  %4283 = vmatprep.subr.bf16.mxu0 0
  %4284 = vmatpush1.bf16.msra.mxu0 %v3846
  %4285 = vmatprep.subr.bf16.mxu0 0
  %4286 = vmatpush1.bf16.msra.mxu0 %v3847
  %4287 = vmatprep.subr.bf16.mxu0 0
  %4288 = vmatpush1.bf16.msra.mxu0 %v3848
  %4289 = vmatprep.subr.bf16.mxu0 0
  %4290 = vmatpush1.bf16.msra.mxu0 %v3849
  %4291 = vmatprep.subr.bf16.mxu0 0
  %4292 = vmatpush1.bf16.msra.mxu0 %v3850
  %4293 = vmatprep.subr.bf16.mxu0 0
  %4294 = vmatpush1.bf16.msra.mxu0 0
  %4295 = vmatprep.subr.bf16.mxu0 0
  %4296 = vmatpush1.bf16.msra.mxu0 0
  %4297 = vmatprep.subr.bf16.mxu0 0
  %4298 = vmatpush1.bf16.msra.mxu0 0
  %4299 = vmatprep.subr.bf16.mxu0 0
  %4300 = vmatpush1.bf16.msra.mxu0 0
  %4301 = vmatprep.subr.bf16.mxu0 0
  %4302 = vmatpush1.bf16.msra.mxu0 0
  %4303 = vmatprep.subr.bf16.mxu0 0
  %4304 = vmatpush1.bf16.msra.mxu0 0
  %4305 = vmatprep.subr.bf16.mxu0 0
  %4306 = vmatpush1.bf16.msra.mxu0 0
  %4307 = vmatprep.subr.bf16.mxu0 0
  %4308 = vmatpush1.bf16.msra.mxu0 0
  %4309 = vmatprep.mubr.bf16.mxu0 0
  %4310 = vmatmul.mubr.bf16.gmra.mrb[0].mxu0 %v3098
  %v4311 = vpop.f32.mrb[0].mxu0
  %v4312 = vadd.f32 %v4119, %v4311
  %v4313 = vpop.f32.mrb[0].mxu0
  %v4314 = vpop.f32.mrb[0].mxu0
  %v4315 = vadd.f32 %v4122, %v4314
  %v4316 = vpop.f32.mrb[0].mxu0
  %4317 = vmatprep.mubr.bf16.mxu0 0
  %4318 = vmatmul.mubr.bf16.gmra.mrb[0].mxu0 %v3113
  %v4319 = vpop.f32.mrb[0].mxu0
  %v4320 = vadd.f32 %v4127, %v4319
  %v4321 = vpop.f32.mrb[0].mxu0
  %v4322 = vpop.f32.mrb[0].mxu0
  %v4323 = vadd.f32 %v4130, %v4322
  %v4324 = vpop.f32.mrb[0].mxu0
  %4325 = vmatprep.mubr.bf16.mxu0 0
  %4326 = vmatmul.mubr.bf16.gmra.mrb[0].mxu0 %v3128
  %v4327 = vpop.f32.mrb[0].mxu0
  %v4328 = vadd.f32 %v4135, %v4327
  %v4329 = vpop.f32.mrb[0].mxu0
  %v4330 = vpop.f32.mrb[0].mxu0
  %v4331 = vadd.f32 %v4138, %v4330
  %v4332 = vpop.f32.mrb[0].mxu0
  %4333 = vmatprep.mubr.bf16.mxu0 0
  %4334 = vmatmul.mubr.bf16.gmra.mrb[0].mxu0 %v3143
  %v4335 = vpop.f32.mrb[0].mxu0
  %v4336 = vadd.f32 %v4143, %v4335
  %v4337 = vpop.f32.mrb[0].mxu0
  %v4338 = vpop.f32.mrb[0].mxu0
  %v4339 = vadd.f32 %v4146, %v4338
  %v4340 = vpop.f32.mrb[0].mxu0
  %4341 = vmatprep.mubr.bf16.mxu0 0
  %4342 = vmatmul.mubr.bf16.gmra.mrb[0].mxu0 %v3158
  %v4343 = vpop.f32.mrb[0].mxu0
  %v4344 = vadd.f32 %v4151, %v4343
  %v4345 = vpop.f32.mrb[0].mxu0
  %v4346 = vpop.f32.mrb[0].mxu0
  %v4347 = vadd.f32 %v4154, %v4346
  %v4348 = vpop.f32.mrb[0].mxu0
  %4349 = vmatprep.mubr.bf16.mxu0 0
  %4350 = vmatmul.mubr.bf16.gmra.mrb[0].mxu0 %v3173
  %v4351 = vpop.f32.mrb[0].mxu0
  %v4352 = vadd.f32 %v4159, %v4351
  %v4353 = vpop.f32.mrb[0].mxu0
  %v4354 = vpop.f32.mrb[0].mxu0
  %v4355 = vadd.f32 %v4162, %v4354
  %v4356 = vpop.f32.mrb[0].mxu0
  %4357 = vmatprep.mubr.bf16.mxu0 0
  %4358 = vmatmul.mubr.bf16.gmra.mrb[0].mxu0 %v3188
  %v4359 = vpop.f32.mrb[0].mxu0
  %v4360 = vadd.f32 %v4167, %v4359
  %v4361 = vpop.f32.mrb[0].mxu0
  %v4362 = vpop.f32.mrb[0].mxu0
  %v4363 = vadd.f32 %v4170, %v4362
  %v4364 = vpop.f32.mrb[0].mxu0
  %4365 = vmatprep.mubr.bf16.mxu0 0
  %4366 = vmatmul.mubr.bf16.gmra.mrb[0].mxu0 %v3203
  %v4367 = vpop.f32.mrb[0].mxu0
  %v4368 = vadd.f32 %v4175, %v4367
  %v4369 = vpop.f32.mrb[0].mxu0
  %v4370 = vpop.f32.mrb[0].mxu0
  %v4371 = vadd.f32 %v4178, %v4370
  %v4372 = vpop.f32.mrb[0].mxu0
  %4373 = vmatprep.mubr.bf16.mxu0 0
  %4374 = vmatmul.mubr.bf16.gmra.mrb[0].mxu0 %v3218
  %v4375 = vpop.f32.mrb[0].mxu0
  %v4376 = vadd.f32 %v4183, %v4375
  %v4377 = vpop.f32.mrb[0].mxu0
  %v4378 = vpop.f32.mrb[0].mxu0
  %v4379 = vadd.f32 %v4186, %v4378
  %v4380 = vpop.f32.mrb[0].mxu0
  %4381 = vmatprep.mubr.bf16.mxu0 0
  %4382 = vmatmul.mubr.bf16.gmra.mrb[0].mxu0 %v3233
  %v4383 = vpop.f32.mrb[0].mxu0
  %v4384 = vadd.f32 %v4191, %v4383
  %v4385 = vpop.f32.mrb[0].mxu0
  %v4386 = vpop.f32.mrb[0].mxu0
  %v4387 = vadd.f32 %v4194, %v4386
  %v4388 = vpop.f32.mrb[0].mxu0
  %4389 = vmatprep.mubr.bf16.mxu0 0
  %4390 = vmatmul.mubr.bf16.gmra.mrb[0].mxu0 %v3308
  %v4391 = vpop.f32.mrb[0].mxu0
  %v4392 = vadd.f32 %v4199, %v4391
  %v4393 = vpop.f32.mrb[0].mxu0
  %v4394 = vpop.f32.mrb[0].mxu0
  %v4395 = vadd.f32 %v4202, %v4394
  %v4396 = vpop.f32.mrb[0].mxu0
  %4397 = vmatprep.mubr.bf16.mxu0 0
  %4398 = vmatmul.mubr.bf16.gmra.mrb[0].mxu0 %v3323
  %v4399 = vpop.f32.mrb[0].mxu0
  %v4400 = vadd.f32 %v4207, %v4399
  %v4401 = vpop.f32.mrb[0].mxu0
  %v4402 = vpop.f32.mrb[0].mxu0
  %v4403 = vadd.f32 %v4210, %v4402
  %v4404 = vpop.f32.mrb[0].mxu0
  %4405 = vmatprep.mubr.bf16.mxu0 0
  %4406 = vmatmul.mubr.bf16.gmra.mrb[0].mxu0 %v3338
  %v4407 = vpop.f32.mrb[0].mxu0
  %v4408 = vadd.f32 %v4215, %v4407
  %v4409 = vpop.f32.mrb[0].mxu0
  %v4410 = vpop.f32.mrb[0].mxu0
  %v4411 = vadd.f32 %v4218, %v4410
  %v4412 = vpop.f32.mrb[0].mxu0
  %4413 = vmatprep.mubr.bf16.mxu0 0
  %4414 = vmatmul.mubr.bf16.gmra.mrb[0].mxu0 %v3353
  %v4415 = vpop.f32.mrb[0].mxu0
  %v4416 = vadd.f32 %v4223, %v4415
  %v4417 = vpop.f32.mrb[0].mxu0
  %v4418 = vpop.f32.mrb[0].mxu0
  %v4419 = vadd.f32 %v4226, %v4418
  %v4420 = vpop.f32.mrb[0].mxu0
  %4421 = vmatprep.mubr.bf16.mxu0 0
  %4422 = vmatmul.mubr.bf16.gmra.mrb[0].mxu0 %v3368
  %v4423 = vpop.f32.mrb[0].mxu0
  %v4424 = vadd.f32 %v4231, %v4423
  %v4425 = vpop.f32.mrb[0].mxu0
  %v4426 = vpop.f32.mrb[0].mxu0
  %v4427 = vadd.f32 %v4234, %v4426
  %v4428 = vpop.f32.mrb[0].mxu0
  %4429 = vmatprep.mubr.bf16.mxu0 0
  %4430 = vmatmul.mubr.bf16.gmra.mrb[0].mxu0 %v3383
  %v4431 = vpop.f32.mrb[0].mxu0
  %v4432 = vadd.f32 %v4239, %v4431
  %v4433 = vpop.f32.mrb[0].mxu0
  %v4434 = vpop.f32.mrb[0].mxu0
  %v4435 = vadd.f32 %v4242, %v4434
  %v4436 = vpop.f32.mrb[0].mxu0
  %4437 = vmatprep.mubr.bf16.mxu0 0
  %4438 = vmatmul.mubr.bf16.gmra.mrb[0].mxu0 %v3398
  %v4439 = vpop.f32.mrb[0].mxu0
  %v4440 = vadd.f32 %v4247, %v4439
  %v4441 = vpop.f32.mrb[0].mxu0
  %v4442 = vpop.f32.mrb[0].mxu0
  %v4443 = vadd.f32 %v4250, %v4442
  %v4444 = vpop.f32.mrb[0].mxu0
  %4445 = vmatprep.mubr.bf16.mxu0 0
  %4446 = vmatmul.mubr.bf16.gmra.mrb[0].mxu0 %v3413
  %v4447 = vpop.f32.mrb[0].mxu0
  %v4448 = vadd.f32 %v4255, %v4447
  %v4449 = vpop.f32.mrb[0].mxu0
  %v4450 = vpop.f32.mrb[0].mxu0
  %v4451 = vadd.f32 %v4258, %v4450
  %v4452 = vpop.f32.mrb[0].mxu0
  %4453 = vmatprep.mubr.bf16.mxu0 0
  %4454 = vmatmul.mubr.bf16.gmra.mrb[0].mxu0 %v3428
  %v4455 = vpop.f32.mrb[0].mxu0
  %v4456 = vadd.f32 %v4263, %v4455
  %v4457 = vpop.f32.mrb[0].mxu0
  %v4458 = vpop.f32.mrb[0].mxu0
  %v4459 = vadd.f32 %v4266, %v4458
  %v4460 = vpop.f32.mrb[0].mxu0
  %4461 = vmatprep.mubr.bf16.mxu0 0
  %4462 = vmatmul.mubr.bf16.gmra.mrb[0].mxu0 %v3443
  %v4463 = vpop.f32.mrb[0].mxu0
  %v4464 = vadd.f32 %v4271, %v4463
  %v4465 = vpop.f32.mrb[0].mxu0
  %v4466 = vpop.f32.mrb[0].mxu0
  %v4467 = vadd.f32 %v4274, %v4466
  %v4468 = vpop.f32.mrb[0].mxu0
  %4469 = vdwg.mxu0
  %v4550 = vunpack.c.l.b16 %v3490
  %v4551 = vunpack.c.l.b16 %v3491
  %v4552 = vunpack.c.l.b16 %v3492
  %v4553 = vunpack.c.l.b16 %v3493
  %v4554 = vunpack.c.l.b16 %v3494
  %v4555 = vunpack.c.l.b16 %v3495
  %v4556 = vunpack.c.l.b16 %v3496
  %v4557 = vunpack.c.l.b16 %v3497
  %v4558 = vunpack.c.l.b16 %v3498
  %v4559 = vunpack.c.l.b16 %v3499
  %v4560 = vunpack.c.l.b16 %v3500
  %v4561 = vunpack.c.l.b16 %v3501
  %v4562 = vunpack.c.l.b16 %v3502
  %v4563 = vunpack.c.l.b16 %v3503
  %v4564 = vunpack.c.l.b16 %v3504
  %v4565 = vunpack.c.l.b16 %v3505
  %v4566 = vunpack.c.l.b16 %v3506
  %v4567 = vunpack.c.l.b16 %v3507
  %v4568 = vunpack.c.l.b16 %v3508
  %v4569 = vunpack.c.l.b16 %v3509
  %v4570 = vunpack.c.l.b16 %v3510
  %v4571 = vunpack.c.l.b16 %v3511
  %v4572 = vunpack.c.l.b16 %v3512
  %v4573 = vunpack.c.l.b16 %v3513
  %v4574 = vunpack.c.l.b16 %v3514
  %v4575 = vunpack.c.l.b16 %v3515
  %v4576 = vunpack.c.l.b16 %v3516
  %v4577 = vunpack.c.l.b16 %v3517
  %v4578 = vunpack.c.l.b16 %v3518
  %v4579 = vunpack.c.l.b16 %v3519
  %v4580 = vunpack.c.l.b16 %v3520
  %v4581 = vunpack.c.l.b16 %v3521
  %v4582 = vunpack.c.l.b16 %v3522
  %v4583 = vunpack.c.l.b16 %v3523
  %v4584 = vunpack.c.l.b16 %v3524
  %v4585 = vunpack.c.l.b16 %v3525
  %v4586 = vunpack.c.l.b16 %v3526
  %v4587 = vunpack.c.l.b16 %v3527
  %v4588 = vunpack.c.l.b16 %v3528
  %v4589 = vunpack.c.l.b16 %v3529
  %v4590 = vunpack.c.l.b16 %v3530
  %v4591 = vunpack.c.l.b16 %v3531
  %v4592 = vunpack.c.l.b16 %v3532
  %v4593 = vunpack.c.l.b16 %v3533
  %v4594 = vunpack.c.l.b16 %v3534
  %v4595 = vunpack.c.l.b16 %v3535
  %v4596 = vunpack.c.l.b16 %v3536
  %v4597 = vunpack.c.l.b16 %v3537
  %v4598 = vunpack.c.l.b16 %v3538
  %v4599 = vunpack.c.l.b16 %v3539
  %v4600 = vunpack.c.l.b16 %v3540
  %v4601 = vunpack.c.l.b16 %v3541
  %v4602 = vunpack.c.l.b16 %v3542
  %v4603 = vunpack.c.l.b16 %v3543
  %v4604 = vunpack.c.l.b16 %v3544
  %v4605 = vunpack.c.l.b16 %v3545
  %v4606 = vunpack.c.l.b16 %v3546
  %v4607 = vunpack.c.l.b16 %v3547
  %v4608 = vunpack.c.l.b16 %v3548
  %v4609 = vunpack.c.l.b16 %v3549
  %v4610 = vunpack.c.l.b16 %v3550
  %v4611 = vunpack.c.l.b16 %v3551
  %v4612 = vunpack.c.l.b16 %v3552
  %v4613 = vunpack.c.l.b16 %v3553
  %v4614 = vunpack.c.l.b16 %v3554
  %v4615 = vunpack.c.l.b16 %v3555
  %v4616 = vunpack.c.l.b16 %v3556
  %v4617 = vunpack.c.l.b16 %v3557
  %v4618 = vunpack.c.l.b16 %v3558
  %v4619 = vunpack.c.l.b16 %v3559
  %v4620 = vunpack.c.l.b16 %v3560
  %v4621 = vunpack.c.l.b16 %v3561
  %v4622 = vunpack.c.l.b16 %v3562
  %v4623 = vunpack.c.l.b16 %v3563
  %v4624 = vunpack.c.l.b16 %v3564
  %v4625 = vunpack.c.l.b16 %v3565
  %v4626 = vunpack.c.l.b16 %v3566
  %v4627 = vunpack.c.l.b16 %v3567
  %v4628 = vunpack.c.l.b16 %v3568
  %v4629 = vunpack.c.l.b16 %v3569
  %v4630 = vpack.c.b16 %v4551, %v4550
  %v4631 = vpack.c.b16 %v4553, %v4552
  %v4632 = vpack.c.b16 %v4555, %v4554
  %v4633 = vpack.c.b16 %v4557, %v4556
  %v4634 = vpack.c.b16 %v4559, %v4558
  %v4635 = vpack.c.b16 %v4561, %v4560
  %v4636 = vpack.c.b16 %v4563, %v4562
  %v4637 = vpack.c.b16 %v4565, %v4564
  %v4638 = vpack.c.b16 %v4567, %v4566
  %v4639 = vpack.c.b16 %v4569, %v4568
  %v4640 = vpack.c.b16 %v4571, %v4570
  %v4641 = vpack.c.b16 %v4573, %v4572
  %v4642 = vpack.c.b16 %v4575, %v4574
  %v4643 = vpack.c.b16 %v4577, %v4576
  %v4644 = vpack.c.b16 %v4579, %v4578
  %v4645 = vpack.c.b16 %v4581, %v4580
  %v4646 = vpack.c.b16 %v4583, %v4582
  %v4647 = vpack.c.b16 %v4585, %v4584
  %v4648 = vpack.c.b16 %v4587, %v4586
  %v4649 = vpack.c.b16 %v4589, %v4588
  %v4650 = vpack.c.b16 %v4591, %v4590
  %v4651 = vpack.c.b16 %v4593, %v4592
  %v4652 = vpack.c.b16 %v4595, %v4594
  %v4653 = vpack.c.b16 %v4597, %v4596
  %v4654 = vpack.c.b16 %v4599, %v4598
  %v4655 = vpack.c.b16 %v4601, %v4600
  %v4656 = vpack.c.b16 %v4603, %v4602
  %v4657 = vpack.c.b16 %v4605, %v4604
  %v4658 = vpack.c.b16 %v4607, %v4606
  %v4659 = vpack.c.b16 %v4609, %v4608
  %v4660 = vpack.c.b16 %v4611, %v4610
  %v4661 = vpack.c.b16 %v4613, %v4612
  %v4662 = vpack.c.b16 %v4615, %v4614
  %v4663 = vpack.c.b16 %v4617, %v4616
  %v4664 = vpack.c.b16 %v4619, %v4618
  %v4665 = vpack.c.b16 %v4621, %v4620
  %v4666 = vpack.c.b16 %v4623, %v4622
  %v4667 = vpack.c.b16 %v4625, %v4624
  %v4668 = vpack.c.b16 %v4627, %v4626
  %v4669 = vpack.c.b16 %v4629, %v4628
  %4710 = vmatprep.subr.bf16.mxu0 0
  %4711 = vmatpush1.bf16.msra.mxu0 %v4630
  %4712 = vmatprep.subr.bf16.mxu0 0
  %4713 = vmatpush1.bf16.msra.mxu0 %v4631
  %4714 = vmatprep.subr.bf16.mxu0 0
  %4715 = vmatpush1.bf16.msra.mxu0 %v4632
  %4716 = vmatprep.subr.bf16.mxu0 0
  %4717 = vmatpush1.bf16.msra.mxu0 %v4633
  %4718 = vmatprep.subr.bf16.mxu0 0
  %4719 = vmatpush1.bf16.msra.mxu0 %v4634
  %4720 = vmatprep.subr.bf16.mxu0 0
  %4721 = vmatpush1.bf16.msra.mxu0 %v4635
  %4722 = vmatprep.subr.bf16.mxu0 0
  %4723 = vmatpush1.bf16.msra.mxu0 %v4636
  %4724 = vmatprep.subr.bf16.mxu0 0
  %4725 = vmatpush1.bf16.msra.mxu0 %v4637
  %4726 = vmatprep.subr.bf16.mxu0 0
  %4727 = vmatpush1.bf16.msra.mxu0 %v4638
  %4728 = vmatprep.subr.bf16.mxu0 0
  %4729 = vmatpush1.bf16.msra.mxu0 %v4639
  %4730 = vmatprep.subr.bf16.mxu0 0
  %4731 = vmatpush1.bf16.msra.mxu0 %v4640
  %4732 = vmatprep.subr.bf16.mxu0 0
  %4733 = vmatpush1.bf16.msra.mxu0 %v4641
  %4734 = vmatprep.subr.bf16.mxu0 0
  %4735 = vmatpush1.bf16.msra.mxu0 %v4642
  %4736 = vmatprep.subr.bf16.mxu0 0
  %4737 = vmatpush1.bf16.msra.mxu0 %v4643
  %4738 = vmatprep.subr.bf16.mxu0 0
  %4739 = vmatpush1.bf16.msra.mxu0 %v4644
  %4740 = vmatprep.subr.bf16.mxu0 0
  %4741 = vmatpush1.bf16.msra.mxu0 %v4645
  %4742 = vmatprep.mubr.bf16.mxu0 %v3074
  %4743 = vmatmul.mubr.bf16.gmra.mrb[0].mxu0 %v3071
  %v4744 = vpop.f32.mrb[0].mxu0
  %v4745 = vadd.f32 %v4312, %v4744
  %v4746 = vpop.f32.mrb[0].mxu0
  %v4747 = vpop.f32.mrb[0].mxu0
  %v4748 = vadd.f32 %v4315, %v4747
  %v4749 = vpop.f32.mrb[0].mxu0
  %4750 = vmatprep.mubr.bf16.mxu0 %v3089
  %4751 = vmatmul.mubr.bf16.gmra.mrb[0].mxu0 %v3086
  %v4752 = vpop.f32.mrb[0].mxu0
  %v4753 = vadd.f32 %v4320, %v4752
  %v4754 = vpop.f32.mrb[0].mxu0
  %v4755 = vpop.f32.mrb[0].mxu0
  %v4756 = vadd.f32 %v4323, %v4755
  %v4757 = vpop.f32.mrb[0].mxu0
  %4758 = vmatprep.mubr.bf16.mxu0 %v3104
  %4759 = vmatmul.mubr.bf16.gmra.mrb[0].mxu0 %v3101
  %v4760 = vpop.f32.mrb[0].mxu0
  %v4761 = vadd.f32 %v4328, %v4760
  %v4762 = vpop.f32.mrb[0].mxu0
  %v4763 = vpop.f32.mrb[0].mxu0
  %v4764 = vadd.f32 %v4331, %v4763
  %v4765 = vpop.f32.mrb[0].mxu0
  %4766 = vmatprep.mubr.bf16.mxu0 %v3119
  %4767 = vmatmul.mubr.bf16.gmra.mrb[0].mxu0 %v3116
  %v4768 = vpop.f32.mrb[0].mxu0
  %v4769 = vadd.f32 %v4336, %v4768
  %v4770 = vpop.f32.mrb[0].mxu0
  %v4771 = vpop.f32.mrb[0].mxu0
  %v4772 = vadd.f32 %v4339, %v4771
  %v4773 = vpop.f32.mrb[0].mxu0
  %4774 = vmatprep.mubr.bf16.mxu0 %v3134
  %4775 = vmatmul.mubr.bf16.gmra.mrb[0].mxu0 %v3131
  %v4776 = vpop.f32.mrb[0].mxu0
  %v4777 = vadd.f32 %v4344, %v4776
  %v4778 = vpop.f32.mrb[0].mxu0
  %v4779 = vpop.f32.mrb[0].mxu0
  %v4780 = vadd.f32 %v4347, %v4779
  %v4781 = vpop.f32.mrb[0].mxu0
  %4782 = vmatprep.mubr.bf16.mxu0 %v3149
  %4783 = vmatmul.mubr.bf16.gmra.mrb[0].mxu0 %v3146
  %v4784 = vpop.f32.mrb[0].mxu0
  %v4785 = vadd.f32 %v4352, %v4784
  %v4786 = vpop.f32.mrb[0].mxu0
  %v4787 = vpop.f32.mrb[0].mxu0
  %v4788 = vadd.f32 %v4355, %v4787
  %v4789 = vpop.f32.mrb[0].mxu0
  %4790 = vmatprep.mubr.bf16.mxu0 %v3164
  %4791 = vmatmul.mubr.bf16.gmra.mrb[0].mxu0 %v3161
  %v4792 = vpop.f32.mrb[0].mxu0
  %v4793 = vadd.f32 %v4360, %v4792
  %v4794 = vpop.f32.mrb[0].mxu0
  %v4795 = vpop.f32.mrb[0].mxu0
  %v4796 = vadd.f32 %v4363, %v4795
  %v4797 = vpop.f32.mrb[0].mxu0
  %4798 = vmatprep.mubr.bf16.mxu0 %v3179
  %4799 = vmatmul.mubr.bf16.gmra.mrb[0].mxu0 %v3176
  %v4800 = vpop.f32.mrb[0].mxu0
  %v4801 = vadd.f32 %v4368, %v4800
  %v4802 = vpop.f32.mrb[0].mxu0
  %v4803 = vpop.f32.mrb[0].mxu0
  %v4804 = vadd.f32 %v4371, %v4803
  %v4805 = vpop.f32.mrb[0].mxu0
  %4806 = vmatprep.mubr.bf16.mxu0 %v3194
  %4807 = vmatmul.mubr.bf16.gmra.mrb[0].mxu0 %v3191
  %v4808 = vpop.f32.mrb[0].mxu0
  %v4809 = vadd.f32 %v4376, %v4808
  %v4810 = vpop.f32.mrb[0].mxu0
  %v4811 = vpop.f32.mrb[0].mxu0
  %v4812 = vadd.f32 %v4379, %v4811
  %v4813 = vpop.f32.mrb[0].mxu0
  %4814 = vmatprep.mubr.bf16.mxu0 %v3209
  %4815 = vmatmul.mubr.bf16.gmra.mrb[0].mxu0 %v3206
  %v4816 = vpop.f32.mrb[0].mxu0
  %v4817 = vadd.f32 %v4384, %v4816
  %v4818 = vpop.f32.mrb[0].mxu0
  %v4819 = vpop.f32.mrb[0].mxu0
  %v4820 = vadd.f32 %v4387, %v4819
  %v4821 = vpop.f32.mrb[0].mxu0
  %4822 = vmatprep.mubr.bf16.mxu0 %v3284
  %4823 = vmatmul.mubr.bf16.gmra.mrb[0].mxu0 %v3281
  %v4824 = vpop.f32.mrb[0].mxu0
  %v4825 = vadd.f32 %v4392, %v4824
  %v4826 = vpop.f32.mrb[0].mxu0
  %v4827 = vpop.f32.mrb[0].mxu0
  %v4828 = vadd.f32 %v4395, %v4827
  %v4829 = vpop.f32.mrb[0].mxu0
  %4830 = vmatprep.mubr.bf16.mxu0 %v3299
  %4831 = vmatmul.mubr.bf16.gmra.mrb[0].mxu0 %v3296
  %v4832 = vpop.f32.mrb[0].mxu0
  %v4833 = vadd.f32 %v4400, %v4832
  %v4834 = vpop.f32.mrb[0].mxu0
  %v4835 = vpop.f32.mrb[0].mxu0
  %v4836 = vadd.f32 %v4403, %v4835
  %v4837 = vpop.f32.mrb[0].mxu0
  %4838 = vmatprep.mubr.bf16.mxu0 %v3314
  %4839 = vmatmul.mubr.bf16.gmra.mrb[0].mxu0 %v3311
  %v4840 = vpop.f32.mrb[0].mxu0
  %v4841 = vadd.f32 %v4408, %v4840
  %v4842 = vpop.f32.mrb[0].mxu0
  %v4843 = vpop.f32.mrb[0].mxu0
  %v4844 = vadd.f32 %v4411, %v4843
  %v4845 = vpop.f32.mrb[0].mxu0
  %4846 = vmatprep.mubr.bf16.mxu0 %v3329
  %4847 = vmatmul.mubr.bf16.gmra.mrb[0].mxu0 %v3326
  %v4848 = vpop.f32.mrb[0].mxu0
  %v4849 = vadd.f32 %v4416, %v4848
  %v4850 = vpop.f32.mrb[0].mxu0
  %v4851 = vpop.f32.mrb[0].mxu0
  %v4852 = vadd.f32 %v4419, %v4851
  %v4853 = vpop.f32.mrb[0].mxu0
  %4854 = vmatprep.mubr.bf16.mxu0 %v3344
  %4855 = vmatmul.mubr.bf16.gmra.mrb[0].mxu0 %v3341
  %v4856 = vpop.f32.mrb[0].mxu0
  %v4857 = vadd.f32 %v4424, %v4856
  %v4858 = vpop.f32.mrb[0].mxu0
  %v4859 = vpop.f32.mrb[0].mxu0
  %v4860 = vadd.f32 %v4427, %v4859
  %v4861 = vpop.f32.mrb[0].mxu0
  %4862 = vmatprep.mubr.bf16.mxu0 %v3359
  %4863 = vmatmul.mubr.bf16.gmra.mrb[0].mxu0 %v3356
  %v4864 = vpop.f32.mrb[0].mxu0
  %v4865 = vadd.f32 %v4432, %v4864
  %v4866 = vpop.f32.mrb[0].mxu0
  %v4867 = vpop.f32.mrb[0].mxu0
  %v4868 = vadd.f32 %v4435, %v4867
  %v4869 = vpop.f32.mrb[0].mxu0
  %4870 = vmatprep.mubr.bf16.mxu0 %v3374
  %4871 = vmatmul.mubr.bf16.gmra.mrb[0].mxu0 %v3371
  %v4872 = vpop.f32.mrb[0].mxu0
  %v4873 = vadd.f32 %v4440, %v4872
  %v4874 = vpop.f32.mrb[0].mxu0
  %v4875 = vpop.f32.mrb[0].mxu0
  %v4876 = vadd.f32 %v4443, %v4875
  %v4877 = vpop.f32.mrb[0].mxu0
  %4878 = vmatprep.mubr.bf16.mxu0 %v3389
  %4879 = vmatmul.mubr.bf16.gmra.mrb[0].mxu0 %v3386
  %v4880 = vpop.f32.mrb[0].mxu0
  %v4881 = vadd.f32 %v4448, %v4880
  %v4882 = vpop.f32.mrb[0].mxu0
  %v4883 = vpop.f32.mrb[0].mxu0
  %v4884 = vadd.f32 %v4451, %v4883
  %v4885 = vpop.f32.mrb[0].mxu0
  %4886 = vmatprep.mubr.bf16.mxu0 %v3404
  %4887 = vmatmul.mubr.bf16.gmra.mrb[0].mxu0 %v3401
  %v4888 = vpop.f32.mrb[0].mxu0
  %v4889 = vadd.f32 %v4456, %v4888
  %v4890 = vpop.f32.mrb[0].mxu0
  %v4891 = vpop.f32.mrb[0].mxu0
  %v4892 = vadd.f32 %v4459, %v4891
  %v4893 = vpop.f32.mrb[0].mxu0
  %4894 = vmatprep.mubr.bf16.mxu0 %v3419
  %4895 = vmatmul.mubr.bf16.gmra.mrb[0].mxu0 %v3416
  %v4896 = vpop.f32.mrb[0].mxu0
  %v4897 = vadd.f32 %v4464, %v4896
  %v4898 = vpop.f32.mrb[0].mxu0
  %v4899 = vpop.f32.mrb[0].mxu0
  %v4900 = vadd.f32 %v4467, %v4899
  %v4901 = vpop.f32.mrb[0].mxu0
  %4902 = vdwg.mxu0
  %4903 = vmatprep.subr.bf16.mxu0 0
  %4904 = vmatpush1.bf16.msra.mxu0 %v4646
  %4905 = vmatprep.subr.bf16.mxu0 0
  %4906 = vmatpush1.bf16.msra.mxu0 %v4647
  %4907 = vmatprep.subr.bf16.mxu0 0
  %4908 = vmatpush1.bf16.msra.mxu0 %v4648
  %4909 = vmatprep.subr.bf16.mxu0 0
  %4910 = vmatpush1.bf16.msra.mxu0 %v4649
  %4911 = vmatprep.subr.bf16.mxu0 0
  %4912 = vmatpush1.bf16.msra.mxu0 %v4650
  %4913 = vmatprep.subr.bf16.mxu0 0
  %4914 = vmatpush1.bf16.msra.mxu0 %v4651
  %4915 = vmatprep.subr.bf16.mxu0 0
  %4916 = vmatpush1.bf16.msra.mxu0 %v4652
  %4917 = vmatprep.subr.bf16.mxu0 0
  %4918 = vmatpush1.bf16.msra.mxu0 %v4653
  %4919 = vmatprep.subr.bf16.mxu0 0
  %4920 = vmatpush1.bf16.msra.mxu0 %v4654
  %4921 = vmatprep.subr.bf16.mxu0 0
  %4922 = vmatpush1.bf16.msra.mxu0 %v4655
  %4923 = vmatprep.subr.bf16.mxu0 0
  %4924 = vmatpush1.bf16.msra.mxu0 %v4656
  %4925 = vmatprep.subr.bf16.mxu0 0
  %4926 = vmatpush1.bf16.msra.mxu0 %v4657
  %4927 = vmatprep.subr.bf16.mxu0 0
  %4928 = vmatpush1.bf16.msra.mxu0 %v4658
  %4929 = vmatprep.subr.bf16.mxu0 0
  %4930 = vmatpush1.bf16.msra.mxu0 %v4659
  %4931 = vmatprep.subr.bf16.mxu0 0
  %4932 = vmatpush1.bf16.msra.mxu0 %v4660
  %4933 = vmatprep.subr.bf16.mxu0 0
  %4934 = vmatpush1.bf16.msra.mxu0 %v4661
  %4935 = vmatprep.mubr.bf16.mxu0 %v3080
  %4936 = vmatmul.mubr.bf16.gmra.mrb[0].mxu0 %v3077
  %v4937 = vpop.f32.mrb[0].mxu0
  %v4938 = vadd.f32 %v4745, %v4937
  %v4939 = vpop.f32.mrb[0].mxu0
  %v4940 = vpop.f32.mrb[0].mxu0
  %v4941 = vadd.f32 %v4748, %v4940
  %v4942 = vpop.f32.mrb[0].mxu0
  %4943 = vmatprep.mubr.bf16.mxu0 %v3095
  %4944 = vmatmul.mubr.bf16.gmra.mrb[0].mxu0 %v3092
  %v4945 = vpop.f32.mrb[0].mxu0
  %v4946 = vadd.f32 %v4753, %v4945
  %v4947 = vpop.f32.mrb[0].mxu0
  %v4948 = vpop.f32.mrb[0].mxu0
  %v4949 = vadd.f32 %v4756, %v4948
  %v4950 = vpop.f32.mrb[0].mxu0
  %4951 = vmatprep.mubr.bf16.mxu0 %v3110
  %4952 = vmatmul.mubr.bf16.gmra.mrb[0].mxu0 %v3107
  %v4953 = vpop.f32.mrb[0].mxu0
  %v4954 = vadd.f32 %v4761, %v4953
  %v4955 = vpop.f32.mrb[0].mxu0
  %v4956 = vpop.f32.mrb[0].mxu0
  %v4957 = vadd.f32 %v4764, %v4956
  %v4958 = vpop.f32.mrb[0].mxu0
  %4959 = vmatprep.mubr.bf16.mxu0 %v3125
  %4960 = vmatmul.mubr.bf16.gmra.mrb[0].mxu0 %v3122
  %v4961 = vpop.f32.mrb[0].mxu0
  %v4962 = vadd.f32 %v4769, %v4961
  %v4963 = vpop.f32.mrb[0].mxu0
  %v4964 = vpop.f32.mrb[0].mxu0
  %v4965 = vadd.f32 %v4772, %v4964
  %v4966 = vpop.f32.mrb[0].mxu0
  %4967 = vmatprep.mubr.bf16.mxu0 %v3140
  %4968 = vmatmul.mubr.bf16.gmra.mrb[0].mxu0 %v3137
  %v4969 = vpop.f32.mrb[0].mxu0
  %v4970 = vadd.f32 %v4777, %v4969
  %v4971 = vpop.f32.mrb[0].mxu0
  %v4972 = vpop.f32.mrb[0].mxu0
  %v4973 = vadd.f32 %v4780, %v4972
  %v4974 = vpop.f32.mrb[0].mxu0
  %4975 = vmatprep.mubr.bf16.mxu0 %v3155
  %4976 = vmatmul.mubr.bf16.gmra.mrb[0].mxu0 %v3152
  %v4977 = vpop.f32.mrb[0].mxu0
  %v4978 = vadd.f32 %v4785, %v4977
  %v4979 = vpop.f32.mrb[0].mxu0
  %v4980 = vpop.f32.mrb[0].mxu0
  %v4981 = vadd.f32 %v4788, %v4980
  %v4982 = vpop.f32.mrb[0].mxu0
  %4983 = vmatprep.mubr.bf16.mxu0 %v3170
  %4984 = vmatmul.mubr.bf16.gmra.mrb[0].mxu0 %v3167
  %v4985 = vpop.f32.mrb[0].mxu0
  %v4986 = vadd.f32 %v4793, %v4985
  %v4987 = vpop.f32.mrb[0].mxu0
  %v4988 = vpop.f32.mrb[0].mxu0
  %v4989 = vadd.f32 %v4796, %v4988
  %v4990 = vpop.f32.mrb[0].mxu0
  %4991 = vmatprep.mubr.bf16.mxu0 %v3185
  %4992 = vmatmul.mubr.bf16.gmra.mrb[0].mxu0 %v3182
  %v4993 = vpop.f32.mrb[0].mxu0
  %v4994 = vadd.f32 %v4801, %v4993
  %v4995 = vpop.f32.mrb[0].mxu0
  %v4996 = vpop.f32.mrb[0].mxu0
  %v4997 = vadd.f32 %v4804, %v4996
  %v4998 = vpop.f32.mrb[0].mxu0
  %4999 = vmatprep.mubr.bf16.mxu0 %v3200
  %5000 = vmatmul.mubr.bf16.gmra.mrb[0].mxu0 %v3197
  %v5001 = vpop.f32.mrb[0].mxu0
  %v5002 = vadd.f32 %v4809, %v5001
  %v5003 = vpop.f32.mrb[0].mxu0
  %v5004 = vpop.f32.mrb[0].mxu0
  %v5005 = vadd.f32 %v4812, %v5004
  %v5006 = vpop.f32.mrb[0].mxu0
  %5007 = vmatprep.mubr.bf16.mxu0 %v3215
  %5008 = vmatmul.mubr.bf16.gmra.mrb[0].mxu0 %v3212
  %v5009 = vpop.f32.mrb[0].mxu0
  %v5010 = vadd.f32 %v4817, %v5009
  %v5011 = vpop.f32.mrb[0].mxu0
  %v5012 = vpop.f32.mrb[0].mxu0
  %v5013 = vadd.f32 %v4820, %v5012
  %v5014 = vpop.f32.mrb[0].mxu0
  %5015 = vmatprep.mubr.bf16.mxu0 %v3290
  %5016 = vmatmul.mubr.bf16.gmra.mrb[0].mxu0 %v3287
  %v5017 = vpop.f32.mrb[0].mxu0
  %v5018 = vadd.f32 %v4825, %v5017
  %v5019 = vpop.f32.mrb[0].mxu0
  %v5020 = vpop.f32.mrb[0].mxu0
  %v5021 = vadd.f32 %v4828, %v5020
  %v5022 = vpop.f32.mrb[0].mxu0
  %5023 = vmatprep.mubr.bf16.mxu0 %v3305
  %5024 = vmatmul.mubr.bf16.gmra.mrb[0].mxu0 %v3302
  %v5025 = vpop.f32.mrb[0].mxu0
  %v5026 = vadd.f32 %v4833, %v5025
  %v5027 = vpop.f32.mrb[0].mxu0
  %v5028 = vpop.f32.mrb[0].mxu0
  %v5029 = vadd.f32 %v4836, %v5028
  %v5030 = vpop.f32.mrb[0].mxu0
  %5031 = vmatprep.mubr.bf16.mxu0 %v3320
  %5032 = vmatmul.mubr.bf16.gmra.mrb[0].mxu0 %v3317
  %v5033 = vpop.f32.mrb[0].mxu0
  %v5034 = vadd.f32 %v4841, %v5033
  %v5035 = vpop.f32.mrb[0].mxu0
  %v5036 = vpop.f32.mrb[0].mxu0
  %v5037 = vadd.f32 %v4844, %v5036
  %v5038 = vpop.f32.mrb[0].mxu0
  %5039 = vmatprep.mubr.bf16.mxu0 %v3335
  %5040 = vmatmul.mubr.bf16.gmra.mrb[0].mxu0 %v3332
  %v5041 = vpop.f32.mrb[0].mxu0
  %v5042 = vadd.f32 %v4849, %v5041
  %v5043 = vpop.f32.mrb[0].mxu0
  %v5044 = vpop.f32.mrb[0].mxu0
  %v5045 = vadd.f32 %v4852, %v5044
  %v5046 = vpop.f32.mrb[0].mxu0
  %5047 = vmatprep.mubr.bf16.mxu0 %v3350
  %5048 = vmatmul.mubr.bf16.gmra.mrb[0].mxu0 %v3347
  %v5049 = vpop.f32.mrb[0].mxu0
  %v5050 = vadd.f32 %v4857, %v5049
  %v5051 = vpop.f32.mrb[0].mxu0
  %v5052 = vpop.f32.mrb[0].mxu0
  %v5053 = vadd.f32 %v4860, %v5052
  %v5054 = vpop.f32.mrb[0].mxu0
  %5055 = vmatprep.mubr.bf16.mxu0 %v3365
  %5056 = vmatmul.mubr.bf16.gmra.mrb[0].mxu0 %v3362
  %v5057 = vpop.f32.mrb[0].mxu0
  %v5058 = vadd.f32 %v4865, %v5057
  %v5059 = vpop.f32.mrb[0].mxu0
  %v5060 = vpop.f32.mrb[0].mxu0
  %v5061 = vadd.f32 %v4868, %v5060
  %v5062 = vpop.f32.mrb[0].mxu0
  %5063 = vmatprep.mubr.bf16.mxu0 %v3380
  %5064 = vmatmul.mubr.bf16.gmra.mrb[0].mxu0 %v3377
  %v5065 = vpop.f32.mrb[0].mxu0
  %v5066 = vadd.f32 %v4873, %v5065
  %v5067 = vpop.f32.mrb[0].mxu0
  %v5068 = vpop.f32.mrb[0].mxu0
  %v5069 = vadd.f32 %v4876, %v5068
  %v5070 = vpop.f32.mrb[0].mxu0
  %5071 = vmatprep.mubr.bf16.mxu0 %v3395
  %5072 = vmatmul.mubr.bf16.gmra.mrb[0].mxu0 %v3392
  %v5073 = vpop.f32.mrb[0].mxu0
  %v5074 = vadd.f32 %v4881, %v5073
  %v5075 = vpop.f32.mrb[0].mxu0
  %v5076 = vpop.f32.mrb[0].mxu0
  %v5077 = vadd.f32 %v4884, %v5076
  %v5078 = vpop.f32.mrb[0].mxu0
  %5079 = vmatprep.mubr.bf16.mxu0 %v3410
  %5080 = vmatmul.mubr.bf16.gmra.mrb[0].mxu0 %v3407
  %v5081 = vpop.f32.mrb[0].mxu0
  %v5082 = vadd.f32 %v4889, %v5081
  %v5083 = vpop.f32.mrb[0].mxu0
  %v5084 = vpop.f32.mrb[0].mxu0
  %v5085 = vadd.f32 %v4892, %v5084
  %v5086 = vpop.f32.mrb[0].mxu0
  %5087 = vmatprep.mubr.bf16.mxu0 %v3425
  %5088 = vmatmul.mubr.bf16.gmra.mrb[0].mxu0 %v3422
  %v5089 = vpop.f32.mrb[0].mxu0
  %v5090 = vadd.f32 %v4897, %v5089
  %v5091 = vpop.f32.mrb[0].mxu0
  %v5092 = vpop.f32.mrb[0].mxu0
  %v5093 = vadd.f32 %v4900, %v5092
  %v5094 = vpop.f32.mrb[0].mxu0
  %5095 = vdwg.mxu0
  %5096 = vmatprep.subr.bf16.mxu0 0
  %5097 = vmatpush1.bf16.msra.mxu0 %v4662
  %5098 = vmatprep.subr.bf16.mxu0 0
  %5099 = vmatpush1.bf16.msra.mxu0 %v4663
  %5100 = vmatprep.subr.bf16.mxu0 0
  %5101 = vmatpush1.bf16.msra.mxu0 %v4664
  %5102 = vmatprep.subr.bf16.mxu0 0
  %5103 = vmatpush1.bf16.msra.mxu0 %v4665
  %5104 = vmatprep.subr.bf16.mxu0 0
  %5105 = vmatpush1.bf16.msra.mxu0 %v4666
  %5106 = vmatprep.subr.bf16.mxu0 0
  %5107 = vmatpush1.bf16.msra.mxu0 %v4667
  %5108 = vmatprep.subr.bf16.mxu0 0
  %5109 = vmatpush1.bf16.msra.mxu0 %v4668
  %5110 = vmatprep.subr.bf16.mxu0 0
  %5111 = vmatpush1.bf16.msra.mxu0 %v4669
  %5112 = vmatprep.subr.bf16.mxu0 0
  %5113 = vmatpush1.bf16.msra.mxu0 0
  %5114 = vmatprep.subr.bf16.mxu0 0
  %5115 = vmatpush1.bf16.msra.mxu0 0
  %5116 = vmatprep.subr.bf16.mxu0 0
  %5117 = vmatpush1.bf16.msra.mxu0 0
  %5118 = vmatprep.subr.bf16.mxu0 0
  %5119 = vmatpush1.bf16.msra.mxu0 0
  %5120 = vmatprep.subr.bf16.mxu0 0
  %5121 = vmatpush1.bf16.msra.mxu0 0
  %5122 = vmatprep.subr.bf16.mxu0 0
  %5123 = vmatpush1.bf16.msra.mxu0 0
  %5124 = vmatprep.subr.bf16.mxu0 0
  %5125 = vmatpush1.bf16.msra.mxu0 0
  %5126 = vmatprep.subr.bf16.mxu0 0
  %5127 = vmatpush1.bf16.msra.mxu0 0
  %5128 = vmatprep.mubr.bf16.mxu0 0
  %5129 = vmatmul.mubr.bf16.gmra.mrb[0].mxu0 %v3083
  %v5130 = vpop.f32.mrb[0].mxu0
  %v5131 = vadd.f32 %v4938, %v5130
  %v5132 = vpop.f32.mrb[0].mxu0
  %v5133 = vpop.f32.mrb[0].mxu0
  %v5134 = vadd.f32 %v4941, %v5133
  %v5135 = vpop.f32.mrb[0].mxu0
  %5136 = vmatprep.mubr.bf16.mxu0 0
  %5137 = vmatmul.mubr.bf16.gmra.mrb[0].mxu0 %v3098
  %v5138 = vpop.f32.mrb[0].mxu0
  %v5139 = vadd.f32 %v4946, %v5138
  %v5140 = vpop.f32.mrb[0].mxu0
  %v5141 = vpop.f32.mrb[0].mxu0
  %v5142 = vadd.f32 %v4949, %v5141
  %v5143 = vpop.f32.mrb[0].mxu0
  %5144 = vmatprep.mubr.bf16.mxu0 0
  %5145 = vmatmul.mubr.bf16.gmra.mrb[0].mxu0 %v3113
  %v5146 = vpop.f32.mrb[0].mxu0
  %v5147 = vadd.f32 %v4954, %v5146
  %v5148 = vpop.f32.mrb[0].mxu0
  %v5149 = vpop.f32.mrb[0].mxu0
  %v5150 = vadd.f32 %v4957, %v5149
  %v5151 = vpop.f32.mrb[0].mxu0
  %5152 = vmatprep.mubr.bf16.mxu0 0
  %5153 = vmatmul.mubr.bf16.gmra.mrb[0].mxu0 %v3128
  %v5154 = vpop.f32.mrb[0].mxu0
  %v5155 = vadd.f32 %v4962, %v5154
  %v5156 = vpop.f32.mrb[0].mxu0
  %v5157 = vpop.f32.mrb[0].mxu0
  %v5158 = vadd.f32 %v4965, %v5157
  %v5159 = vpop.f32.mrb[0].mxu0
  %5160 = vmatprep.mubr.bf16.mxu0 0
  %5161 = vmatmul.mubr.bf16.gmra.mrb[0].mxu0 %v3143
  %v5162 = vpop.f32.mrb[0].mxu0
  %v5163 = vadd.f32 %v4970, %v5162
  %v5164 = vpop.f32.mrb[0].mxu0
  %v5165 = vpop.f32.mrb[0].mxu0
  %v5166 = vadd.f32 %v4973, %v5165
  %v5167 = vpop.f32.mrb[0].mxu0
  %5168 = vmatprep.mubr.bf16.mxu0 0
  %5169 = vmatmul.mubr.bf16.gmra.mrb[0].mxu0 %v3158
  %v5170 = vpop.f32.mrb[0].mxu0
  %v5171 = vadd.f32 %v4978, %v5170
  %v5172 = vpop.f32.mrb[0].mxu0
  %v5173 = vpop.f32.mrb[0].mxu0
  %v5174 = vadd.f32 %v4981, %v5173
  %v5175 = vpop.f32.mrb[0].mxu0
  %5176 = vmatprep.mubr.bf16.mxu0 0
  %5177 = vmatmul.mubr.bf16.gmra.mrb[0].mxu0 %v3173
  %v5178 = vpop.f32.mrb[0].mxu0
  %v5179 = vadd.f32 %v4986, %v5178
  %v5180 = vpop.f32.mrb[0].mxu0
  %v5181 = vpop.f32.mrb[0].mxu0
  %v5182 = vadd.f32 %v4989, %v5181
  %v5183 = vpop.f32.mrb[0].mxu0
  %5184 = vmatprep.mubr.bf16.mxu0 0
  %5185 = vmatmul.mubr.bf16.gmra.mrb[0].mxu0 %v3188
  %v5186 = vpop.f32.mrb[0].mxu0
  %v5187 = vadd.f32 %v4994, %v5186
  %v5188 = vpop.f32.mrb[0].mxu0
  %v5189 = vpop.f32.mrb[0].mxu0
  %v5190 = vadd.f32 %v4997, %v5189
  %v5191 = vpop.f32.mrb[0].mxu0
  %5192 = vmatprep.mubr.bf16.mxu0 0
  %5193 = vmatmul.mubr.bf16.gmra.mrb[0].mxu0 %v3203
  %v5194 = vpop.f32.mrb[0].mxu0
  %v5195 = vadd.f32 %v5002, %v5194
  %v5196 = vpop.f32.mrb[0].mxu0
  %v5197 = vpop.f32.mrb[0].mxu0
  %v5198 = vadd.f32 %v5005, %v5197
  %v5199 = vpop.f32.mrb[0].mxu0
  %5200 = vmatprep.mubr.bf16.mxu0 0
  %5201 = vmatmul.mubr.bf16.gmra.mrb[0].mxu0 %v3218
  %v5202 = vpop.f32.mrb[0].mxu0
  %v5203 = vadd.f32 %v5010, %v5202
  %v5204 = vpop.f32.mrb[0].mxu0
  %v5205 = vpop.f32.mrb[0].mxu0
  %v5206 = vadd.f32 %v5013, %v5205
  %v5207 = vpop.f32.mrb[0].mxu0
  %5208 = vmatprep.mubr.bf16.mxu0 0
  %5209 = vmatmul.mubr.bf16.gmra.mrb[0].mxu0 %v3293
  %v5210 = vpop.f32.mrb[0].mxu0
  %v5211 = vadd.f32 %v5018, %v5210
  %v5212 = vpop.f32.mrb[0].mxu0
  %v5213 = vpop.f32.mrb[0].mxu0
  %v5214 = vadd.f32 %v5021, %v5213
  %v5215 = vpop.f32.mrb[0].mxu0
  %5216 = vmatprep.mubr.bf16.mxu0 0
  %5217 = vmatmul.mubr.bf16.gmra.mrb[0].mxu0 %v3308
  %v5218 = vpop.f32.mrb[0].mxu0
  %v5219 = vadd.f32 %v5026, %v5218
  %v5220 = vpop.f32.mrb[0].mxu0
  %v5221 = vpop.f32.mrb[0].mxu0
  %v5222 = vadd.f32 %v5029, %v5221
  %v5223 = vpop.f32.mrb[0].mxu0
  %5224 = vmatprep.mubr.bf16.mxu0 0
  %5225 = vmatmul.mubr.bf16.gmra.mrb[0].mxu0 %v3323
  %v5226 = vpop.f32.mrb[0].mxu0
  %v5227 = vadd.f32 %v5034, %v5226
  %v5228 = vpop.f32.mrb[0].mxu0
  %v5229 = vpop.f32.mrb[0].mxu0
  %v5230 = vadd.f32 %v5037, %v5229
  %v5231 = vpop.f32.mrb[0].mxu0
  %5232 = vmatprep.mubr.bf16.mxu0 0
  %5233 = vmatmul.mubr.bf16.gmra.mrb[0].mxu0 %v3338
  %v5234 = vpop.f32.mrb[0].mxu0
  %v5235 = vadd.f32 %v5042, %v5234
  %v5236 = vpop.f32.mrb[0].mxu0
  %v5237 = vpop.f32.mrb[0].mxu0
  %v5238 = vadd.f32 %v5045, %v5237
  %v5239 = vpop.f32.mrb[0].mxu0
  %5240 = vmatprep.mubr.bf16.mxu0 0
  %5241 = vmatmul.mubr.bf16.gmra.mrb[0].mxu0 %v3353
  %v5242 = vpop.f32.mrb[0].mxu0
  %v5243 = vadd.f32 %v5050, %v5242
  %v5244 = vpop.f32.mrb[0].mxu0
  %v5245 = vpop.f32.mrb[0].mxu0
  %v5246 = vadd.f32 %v5053, %v5245
  %v5247 = vpop.f32.mrb[0].mxu0
  %5248 = vmatprep.mubr.bf16.mxu0 0
  %5249 = vmatmul.mubr.bf16.gmra.mrb[0].mxu0 %v3368
  %v5250 = vpop.f32.mrb[0].mxu0
  %v5251 = vadd.f32 %v5058, %v5250
  %v5252 = vpop.f32.mrb[0].mxu0
  %v5253 = vpop.f32.mrb[0].mxu0
  %v5254 = vadd.f32 %v5061, %v5253
  %v5255 = vpop.f32.mrb[0].mxu0
  %5256 = vmatprep.mubr.bf16.mxu0 0
  %5257 = vmatmul.mubr.bf16.gmra.mrb[0].mxu0 %v3383
  %v5258 = vpop.f32.mrb[0].mxu0
  %v5259 = vadd.f32 %v5066, %v5258
  %v5260 = vpop.f32.mrb[0].mxu0
  %v5261 = vpop.f32.mrb[0].mxu0
  %v5262 = vadd.f32 %v5069, %v5261
  %v5263 = vpop.f32.mrb[0].mxu0
  %5264 = vmatprep.mubr.bf16.mxu0 0
  %5265 = vmatmul.mubr.bf16.gmra.mrb[0].mxu0 %v3398
  %v5266 = vpop.f32.mrb[0].mxu0
  %v5267 = vadd.f32 %v5074, %v5266
  %v5268 = vpop.f32.mrb[0].mxu0
  %v5269 = vpop.f32.mrb[0].mxu0
  %v5270 = vadd.f32 %v5077, %v5269
  %v5271 = vpop.f32.mrb[0].mxu0
  %5272 = vmatprep.mubr.bf16.mxu0 0
  %5273 = vmatmul.mubr.bf16.gmra.mrb[0].mxu0 %v3413
  %v5274 = vpop.f32.mrb[0].mxu0
  %v5275 = vadd.f32 %v5082, %v5274
  %v5276 = vpop.f32.mrb[0].mxu0
  %v5277 = vpop.f32.mrb[0].mxu0
  %v5278 = vadd.f32 %v5085, %v5277
  %v5279 = vpop.f32.mrb[0].mxu0
  %5280 = vmatprep.mubr.bf16.mxu0 0
  %5281 = vmatmul.mubr.bf16.gmra.mrb[0].mxu0 %v3428
  %v5282 = vpop.f32.mrb[0].mxu0
  %v5283 = vadd.f32 %v5090, %v5282
  %v5284 = vpop.f32.mrb[0].mxu0
  %v5285 = vpop.f32.mrb[0].mxu0
  %v5286 = vadd.f32 %v5093, %v5285
  %v5287 = vpop.f32.mrb[0].mxu0
  %5288 = vdwg.mxu0
  %s5289 = scalar_lea.vmem %s3, 640
  %v5290 = vld [vmem:[%s5289] sm:$0xf]
  %v5291 = vld [vmem:[%s5289 + $0x4] sm:$0xf]
  %v5292 = vld [vmem:[%s5289 + $0x8] sm:$0xf]
  %v5293 = vld [vmem:[%s5289 + $0xc] sm:$0xf]
  %v5294 = vld [vmem:[%s5289 + $0x10] sm:$0xf]
  %v5295 = vld [vmem:[%s5289 + $0x14] sm:$0xf]
  %v5296 = vld [vmem:[%s5289 + $0x18] sm:$0xf]
  %v5297 = vld [vmem:[%s5289 + $0x1c] sm:$0xf]
  %v5298 = vld [vmem:[%s5289 + $0x20] sm:$0xf]
  %v5299 = vld [vmem:[%s5289 + $0x24] sm:$0xf]
  %v5300 = vld [vmem:[%s5289 + $0x28] sm:$0xf]
  %v5301 = vld [vmem:[%s5289 + $0x2c] sm:$0xf]
  %v5302 = vld [vmem:[%s5289 + $0x30] sm:$0xf]
  %v5303 = vld [vmem:[%s5289 + $0x34] sm:$0xf]
  %v5304 = vld [vmem:[%s5289 + $0x38] sm:$0xf]
  %v5305 = vld [vmem:[%s5289 + $0x3c] sm:$0xf]
  %v5306 = vld [vmem:[%s5289 + $0x40] sm:$0xf]
  %v5307 = vld [vmem:[%s5289 + $0x44] sm:$0xf]
  %v5308 = vld [vmem:[%s5289 + $0x48] sm:$0xf]
  %v5309 = vld [vmem:[%s5289 + $0x4c] sm:$0xf]
  %v5310 = vld [vmem:[%s5289 + $0x50] sm:$0xf]
  %v5311 = vld [vmem:[%s5289 + $0x54] sm:$0xf]
  %v5312 = vld [vmem:[%s5289 + $0x58] sm:$0xf]
  %v5313 = vld [vmem:[%s5289 + $0x5c] sm:$0xf]
  %v5314 = vld [vmem:[%s5289 + $0x60] sm:$0xf]
  %v5315 = vld [vmem:[%s5289 + $0x64] sm:$0xf]
  %v5316 = vld [vmem:[%s5289 + $0x68] sm:$0xf]
  %v5317 = vld [vmem:[%s5289 + $0x6c] sm:$0xf]
  %v5318 = vld [vmem:[%s5289 + $0x70] sm:$0xf]
  %v5319 = vld [vmem:[%s5289 + $0x74] sm:$0xf]
  %v5320 = vld [vmem:[%s5289 + $0x78] sm:$0xf]
  %v5321 = vld [vmem:[%s5289 + $0x7c] sm:$0xf]
  %v5322 = vld [vmem:[%s5289 + $0x80] sm:$0xf]
  %v5323 = vld [vmem:[%s5289 + $0x84] sm:$0xf]
  %v5324 = vld [vmem:[%s5289 + $0x88] sm:$0xf]
  %v5325 = vld [vmem:[%s5289 + $0x8c] sm:$0xf]
  %v5326 = vld [vmem:[%s5289 + $0x90] sm:$0xf]
  %v5327 = vld [vmem:[%s5289 + $0x94] sm:$0xf]
  %v5328 = vld [vmem:[%s5289 + $0x98] sm:$0xf]
  %v5329 = vld [vmem:[%s5289 + $0x9c] sm:$0xf]
  %v5330 = vld [vmem:[%s5289 + $0xa0] sm:$0xf]
  %v5331 = vld [vmem:[%s5289 + $0xa4] sm:$0xf]
  %v5332 = vld [vmem:[%s5289 + $0xa8] sm:$0xf]
  %v5333 = vld [vmem:[%s5289 + $0xac] sm:$0xf]
  %v5334 = vld [vmem:[%s5289 + $0xb0] sm:$0xf]
  %v5335 = vld [vmem:[%s5289 + $0xb4] sm:$0xf]
  %v5336 = vld [vmem:[%s5289 + $0xb8] sm:$0xf]
  %v5337 = vld [vmem:[%s5289 + $0xbc] sm:$0xf]
  %v5338 = vld [vmem:[%s5289 + $0xc0] sm:$0xf]
  %v5339 = vld [vmem:[%s5289 + $0xc4] sm:$0xf]
  %v5340 = vld [vmem:[%s5289 + $0xc8] sm:$0xf]
  %v5341 = vld [vmem:[%s5289 + $0xcc] sm:$0xf]
  %v5342 = vld [vmem:[%s5289 + $0xd0] sm:$0xf]
  %v5343 = vld [vmem:[%s5289 + $0xd4] sm:$0xf]
  %v5344 = vld [vmem:[%s5289 + $0xd8] sm:$0xf]
  %v5345 = vld [vmem:[%s5289 + $0xdc] sm:$0xf]
  %v5346 = vld [vmem:[%s5289 + $0xe0] sm:$0xf]
  %v5347 = vld [vmem:[%s5289 + $0xe4] sm:$0xf]
  %v5348 = vld [vmem:[%s5289 + $0xe8] sm:$0xf]
  %v5349 = vld [vmem:[%s5289 + $0xec] sm:$0xf]
  %v5350 = vld [vmem:[%s5289 + $0xf0] sm:$0xf]
  %v5351 = vld [vmem:[%s5289 + $0xf4] sm:$0xf]
  %v5352 = vld [vmem:[%s5289 + $0xf8] sm:$0xf]
  %v5353 = vld [vmem:[%s5289 + $0xfc] sm:$0xf]
  %v5354 = vld [vmem:[%s5289 + $0x100] sm:$0xf]
  %v5355 = vld [vmem:[%s5289 + $0x104] sm:$0xf]
  %v5356 = vld [vmem:[%s5289 + $0x108] sm:$0xf]
  %v5357 = vld [vmem:[%s5289 + $0x10c] sm:$0xf]
  %v5358 = vld [vmem:[%s5289 + $0x110] sm:$0xf]
  %v5359 = vld [vmem:[%s5289 + $0x114] sm:$0xf]
  %v5360 = vld [vmem:[%s5289 + $0x118] sm:$0xf]
  %v5361 = vld [vmem:[%s5289 + $0x11c] sm:$0xf]
  %v5362 = vld [vmem:[%s5289 + $0x120] sm:$0xf]
  %v5363 = vld [vmem:[%s5289 + $0x124] sm:$0xf]
  %v5364 = vld [vmem:[%s5289 + $0x128] sm:$0xf]
  %v5365 = vld [vmem:[%s5289 + $0x12c] sm:$0xf]
  %v5366 = vld [vmem:[%s5289 + $0x130] sm:$0xf]
  %v5367 = vld [vmem:[%s5289 + $0x134] sm:$0xf]
  %v5368 = vld [vmem:[%s5289 + $0x138] sm:$0xf]
  %v5369 = vld [vmem:[%s5289 + $0x13c] sm:$0xf]
  %v5450 = vunpack.c.l.b16 %v5290
  %v5451 = vunpack.c.l.b16 %v5291
  %v5452 = vunpack.c.l.b16 %v5292
  %v5453 = vunpack.c.l.b16 %v5293
  %v5454 = vunpack.c.l.b16 %v5294
  %v5455 = vunpack.c.l.b16 %v5295
  %v5456 = vunpack.c.l.b16 %v5296
  %v5457 = vunpack.c.l.b16 %v5297
  %v5458 = vunpack.c.l.b16 %v5298
  %v5459 = vunpack.c.l.b16 %v5299
  %v5460 = vunpack.c.l.b16 %v5300
  %v5461 = vunpack.c.l.b16 %v5301
  %v5462 = vunpack.c.l.b16 %v5302
  %v5463 = vunpack.c.l.b16 %v5303
  %v5464 = vunpack.c.l.b16 %v5304
  %v5465 = vunpack.c.l.b16 %v5305
  %v5466 = vunpack.c.l.b16 %v5306
  %v5467 = vunpack.c.l.b16 %v5307
  %v5468 = vunpack.c.l.b16 %v5308
  %v5469 = vunpack.c.l.b16 %v5309
  %v5470 = vunpack.c.l.b16 %v5310
  %v5471 = vunpack.c.l.b16 %v5311
  %v5472 = vunpack.c.l.b16 %v5312
  %v5473 = vunpack.c.l.b16 %v5313
  %v5474 = vunpack.c.l.b16 %v5314
  %v5475 = vunpack.c.l.b16 %v5315
  %v5476 = vunpack.c.l.b16 %v5316
  %v5477 = vunpack.c.l.b16 %v5317
  %v5478 = vunpack.c.l.b16 %v5318
  %v5479 = vunpack.c.l.b16 %v5319
  %v5480 = vunpack.c.l.b16 %v5320
  %v5481 = vunpack.c.l.b16 %v5321
  %v5482 = vunpack.c.l.b16 %v5322
  %v5483 = vunpack.c.l.b16 %v5323
  %v5484 = vunpack.c.l.b16 %v5324
  %v5485 = vunpack.c.l.b16 %v5325
  %v5486 = vunpack.c.l.b16 %v5326
  %v5487 = vunpack.c.l.b16 %v5327
  %v5488 = vunpack.c.l.b16 %v5328
  %v5489 = vunpack.c.l.b16 %v5329
  %v5490 = vunpack.c.l.b16 %v5330
  %v5491 = vunpack.c.l.b16 %v5331
  %v5492 = vunpack.c.l.b16 %v5332
  %v5493 = vunpack.c.l.b16 %v5333
  %v5494 = vunpack.c.l.b16 %v5334
  %v5495 = vunpack.c.l.b16 %v5335
  %v5496 = vunpack.c.l.b16 %v5336
  %v5497 = vunpack.c.l.b16 %v5337
  %v5498 = vunpack.c.l.b16 %v5338
  %v5499 = vunpack.c.l.b16 %v5339
  %v5500 = vunpack.c.l.b16 %v5340
  %v5501 = vunpack.c.l.b16 %v5341
  %v5502 = vunpack.c.l.b16 %v5342
  %v5503 = vunpack.c.l.b16 %v5343
  %v5504 = vunpack.c.l.b16 %v5344
  %v5505 = vunpack.c.l.b16 %v5345
  %v5506 = vunpack.c.l.b16 %v5346
  %v5507 = vunpack.c.l.b16 %v5347
  %v5508 = vunpack.c.l.b16 %v5348
  %v5509 = vunpack.c.l.b16 %v5349
  %v5510 = vunpack.c.l.b16 %v5350
  %v5511 = vunpack.c.l.b16 %v5351
  %v5512 = vunpack.c.l.b16 %v5352
  %v5513 = vunpack.c.l.b16 %v5353
  %v5514 = vunpack.c.l.b16 %v5354
  %v5515 = vunpack.c.l.b16 %v5355
  %v5516 = vunpack.c.l.b16 %v5356
  %v5517 = vunpack.c.l.b16 %v5357
  %v5518 = vunpack.c.l.b16 %v5358
  %v5519 = vunpack.c.l.b16 %v5359
  %v5520 = vunpack.c.l.b16 %v5360
  %v5521 = vunpack.c.l.b16 %v5361
  %v5522 = vunpack.c.l.b16 %v5362
  %v5523 = vunpack.c.l.b16 %v5363
  %v5524 = vunpack.c.l.b16 %v5364
  %v5525 = vunpack.c.l.b16 %v5365
  %v5526 = vunpack.c.l.b16 %v5366
  %v5527 = vunpack.c.l.b16 %v5367
  %v5528 = vunpack.c.l.b16 %v5368
  %v5529 = vunpack.c.l.b16 %v5369
  %v5530 = vpack.c.b16 %v5451, %v5450
  %v5531 = vpack.c.b16 %v5453, %v5452
  %v5532 = vpack.c.b16 %v5455, %v5454
  %v5533 = vpack.c.b16 %v5457, %v5456
  %v5534 = vpack.c.b16 %v5459, %v5458
  %v5535 = vpack.c.b16 %v5461, %v5460
  %v5536 = vpack.c.b16 %v5463, %v5462
  %v5537 = vpack.c.b16 %v5465, %v5464
  %v5538 = vpack.c.b16 %v5467, %v5466
  %v5539 = vpack.c.b16 %v5469, %v5468
  %v5540 = vpack.c.b16 %v5471, %v5470
  %v5541 = vpack.c.b16 %v5473, %v5472
  %v5542 = vpack.c.b16 %v5475, %v5474
  %v5543 = vpack.c.b16 %v5477, %v5476
  %v5544 = vpack.c.b16 %v5479, %v5478
  %v5545 = vpack.c.b16 %v5481, %v5480
  %v5546 = vpack.c.b16 %v5483, %v5482
  %v5547 = vpack.c.b16 %v5485, %v5484
  %v5548 = vpack.c.b16 %v5487, %v5486
  %v5549 = vpack.c.b16 %v5489, %v5488
  %v5550 = vpack.c.b16 %v5491, %v5490
  %v5551 = vpack.c.b16 %v5493, %v5492
  %v5552 = vpack.c.b16 %v5495, %v5494
  %v5553 = vpack.c.b16 %v5497, %v5496
  %v5554 = vpack.c.b16 %v5499, %v5498
  %v5555 = vpack.c.b16 %v5501, %v5500
  %v5556 = vpack.c.b16 %v5503, %v5502
  %v5557 = vpack.c.b16 %v5505, %v5504
  %v5558 = vpack.c.b16 %v5507, %v5506
  %v5559 = vpack.c.b16 %v5509, %v5508
  %v5560 = vpack.c.b16 %v5511, %v5510
  %v5561 = vpack.c.b16 %v5513, %v5512
  %v5562 = vpack.c.b16 %v5515, %v5514
  %v5563 = vpack.c.b16 %v5517, %v5516
  %v5564 = vpack.c.b16 %v5519, %v5518
  %v5565 = vpack.c.b16 %v5521, %v5520
  %v5566 = vpack.c.b16 %v5523, %v5522
  %v5567 = vpack.c.b16 %v5525, %v5524
  %v5568 = vpack.c.b16 %v5527, %v5526
  %v5569 = vpack.c.b16 %v5529, %v5528
  %5610 = vmatprep.subr.bf16.mxu0 0
  %5611 = vmatpush1.bf16.msra.mxu0 %v5530
  %5612 = vmatprep.subr.bf16.mxu0 0
  %5613 = vmatpush1.bf16.msra.mxu0 %v5531
  %5614 = vmatprep.subr.bf16.mxu0 0
  %5615 = vmatpush1.bf16.msra.mxu0 %v5532
  %5616 = vmatprep.subr.bf16.mxu0 0
  %5617 = vmatpush1.bf16.msra.mxu0 %v5533
  %5618 = vmatprep.subr.bf16.mxu0 0
  %5619 = vmatpush1.bf16.msra.mxu0 %v5534
  %5620 = vmatprep.subr.bf16.mxu0 0
  %5621 = vmatpush1.bf16.msra.mxu0 %v5535
  %5622 = vmatprep.subr.bf16.mxu0 0
  %5623 = vmatpush1.bf16.msra.mxu0 %v5536
  %5624 = vmatprep.subr.bf16.mxu0 0
  %5625 = vmatpush1.bf16.msra.mxu0 %v5537
  %5626 = vmatprep.subr.bf16.mxu0 0
  %5627 = vmatpush1.bf16.msra.mxu0 %v5538
  %5628 = vmatprep.subr.bf16.mxu0 0
  %5629 = vmatpush1.bf16.msra.mxu0 %v5539
  %5630 = vmatprep.subr.bf16.mxu0 0
  %5631 = vmatpush1.bf16.msra.mxu0 %v5540
  %5632 = vmatprep.subr.bf16.mxu0 0
  %5633 = vmatpush1.bf16.msra.mxu0 %v5541
  %5634 = vmatprep.subr.bf16.mxu0 0
  %5635 = vmatpush1.bf16.msra.mxu0 %v5542
  %5636 = vmatprep.subr.bf16.mxu0 0
  %5637 = vmatpush1.bf16.msra.mxu0 %v5543
  %5638 = vmatprep.subr.bf16.mxu0 0
  %5639 = vmatpush1.bf16.msra.mxu0 %v5544
  %5640 = vmatprep.subr.bf16.mxu0 0
  %5641 = vmatpush1.bf16.msra.mxu0 %v5545
  %5642 = vmatprep.mubr.bf16.mxu0 %v3104
  %5643 = vmatmul.mubr.bf16.gmra.mrb[0].mxu0 %v3101
  %v5644 = vpop.f32.mrb[0].mxu0
  %v5645 = vadd.f32 0.0, %v5644
  %v5646 = vpop.f32.mrb[0].mxu0
  %v5647 = vpop.f32.mrb[0].mxu0
  %v5648 = vadd.f32 0.0, %v5647
  %v5649 = vpop.f32.mrb[0].mxu0
  %5650 = vmatprep.mubr.bf16.mxu0 %v3119
  %5651 = vmatmul.mubr.bf16.gmra.mrb[0].mxu0 %v3116
  %v5652 = vpop.f32.mrb[0].mxu0
  %v5653 = vadd.f32 0.0, %v5652
  %v5654 = vpop.f32.mrb[0].mxu0
  %v5655 = vpop.f32.mrb[0].mxu0
  %v5656 = vadd.f32 0.0, %v5655
  %v5657 = vpop.f32.mrb[0].mxu0
  %5658 = vmatprep.mubr.bf16.mxu0 %v3134
  %5659 = vmatmul.mubr.bf16.gmra.mrb[0].mxu0 %v3131
  %v5660 = vpop.f32.mrb[0].mxu0
  %v5661 = vadd.f32 0.0, %v5660
  %v5662 = vpop.f32.mrb[0].mxu0
  %v5663 = vpop.f32.mrb[0].mxu0
  %v5664 = vadd.f32 0.0, %v5663
  %v5665 = vpop.f32.mrb[0].mxu0
  %5666 = vmatprep.mubr.bf16.mxu0 %v3149
  %5667 = vmatmul.mubr.bf16.gmra.mrb[0].mxu0 %v3146
  %v5668 = vpop.f32.mrb[0].mxu0
  %v5669 = vadd.f32 0.0, %v5668
  %v5670 = vpop.f32.mrb[0].mxu0
  %v5671 = vpop.f32.mrb[0].mxu0
  %v5672 = vadd.f32 0.0, %v5671
  %v5673 = vpop.f32.mrb[0].mxu0
  %5674 = vmatprep.mubr.bf16.mxu0 %v3164
  %5675 = vmatmul.mubr.bf16.gmra.mrb[0].mxu0 %v3161
  %v5676 = vpop.f32.mrb[0].mxu0
  %v5677 = vadd.f32 0.0, %v5676
  %v5678 = vpop.f32.mrb[0].mxu0
  %v5679 = vpop.f32.mrb[0].mxu0
  %v5680 = vadd.f32 0.0, %v5679
  %v5681 = vpop.f32.mrb[0].mxu0
  %5682 = vmatprep.mubr.bf16.mxu0 %v3179
  %5683 = vmatmul.mubr.bf16.gmra.mrb[0].mxu0 %v3176
  %v5684 = vpop.f32.mrb[0].mxu0
  %v5685 = vadd.f32 0.0, %v5684
  %v5686 = vpop.f32.mrb[0].mxu0
  %v5687 = vpop.f32.mrb[0].mxu0
  %v5688 = vadd.f32 0.0, %v5687
  %v5689 = vpop.f32.mrb[0].mxu0
  %5690 = vmatprep.mubr.bf16.mxu0 %v3194
  %5691 = vmatmul.mubr.bf16.gmra.mrb[0].mxu0 %v3191
  %v5692 = vpop.f32.mrb[0].mxu0
  %v5693 = vadd.f32 0.0, %v5692
  %v5694 = vpop.f32.mrb[0].mxu0
  %v5695 = vpop.f32.mrb[0].mxu0
  %v5696 = vadd.f32 0.0, %v5695
  %v5697 = vpop.f32.mrb[0].mxu0
  %5698 = vmatprep.mubr.bf16.mxu0 %v3209
  %5699 = vmatmul.mubr.bf16.gmra.mrb[0].mxu0 %v3206
  %v5700 = vpop.f32.mrb[0].mxu0
  %v5701 = vadd.f32 0.0, %v5700
  %v5702 = vpop.f32.mrb[0].mxu0
  %v5703 = vpop.f32.mrb[0].mxu0
  %v5704 = vadd.f32 0.0, %v5703
  %v5705 = vpop.f32.mrb[0].mxu0
  %5706 = vmatprep.mubr.bf16.mxu0 %v3224
  %5707 = vmatmul.mubr.bf16.gmra.mrb[0].mxu0 %v3221
  %v5708 = vpop.f32.mrb[0].mxu0
  %v5709 = vadd.f32 0.0, %v5708
  %v5710 = vpop.f32.mrb[0].mxu0
  %v5711 = vpop.f32.mrb[0].mxu0
  %v5712 = vadd.f32 0.0, %v5711
  %v5713 = vpop.f32.mrb[0].mxu0
  %5714 = vmatprep.mubr.bf16.mxu0 %v3239
  %5715 = vmatmul.mubr.bf16.gmra.mrb[0].mxu0 %v3236
  %v5716 = vpop.f32.mrb[0].mxu0
  %v5717 = vadd.f32 0.0, %v5716
  %v5718 = vpop.f32.mrb[0].mxu0
  %v5719 = vpop.f32.mrb[0].mxu0
  %v5720 = vadd.f32 0.0, %v5719
  %v5721 = vpop.f32.mrb[0].mxu0
  %5722 = vmatprep.mubr.bf16.mxu0 %v3314
  %5723 = vmatmul.mubr.bf16.gmra.mrb[0].mxu0 %v3311
  %v5724 = vpop.f32.mrb[0].mxu0
  %v5725 = vadd.f32 0.0, %v5724
  %v5726 = vpop.f32.mrb[0].mxu0
  %v5727 = vpop.f32.mrb[0].mxu0
  %v5728 = vadd.f32 0.0, %v5727
  %v5729 = vpop.f32.mrb[0].mxu0
  %5730 = vmatprep.mubr.bf16.mxu0 %v3329
  %5731 = vmatmul.mubr.bf16.gmra.mrb[0].mxu0 %v3326
  %v5732 = vpop.f32.mrb[0].mxu0
  %v5733 = vadd.f32 0.0, %v5732
  %v5734 = vpop.f32.mrb[0].mxu0
  %v5735 = vpop.f32.mrb[0].mxu0
  %v5736 = vadd.f32 0.0, %v5735
  %v5737 = vpop.f32.mrb[0].mxu0
  %5738 = vmatprep.mubr.bf16.mxu0 %v3344
  %5739 = vmatmul.mubr.bf16.gmra.mrb[0].mxu0 %v3341
  %v5740 = vpop.f32.mrb[0].mxu0
  %v5741 = vadd.f32 0.0, %v5740
  %v5742 = vpop.f32.mrb[0].mxu0
  %v5743 = vpop.f32.mrb[0].mxu0
  %v5744 = vadd.f32 0.0, %v5743
  %v5745 = vpop.f32.mrb[0].mxu0
  %5746 = vmatprep.mubr.bf16.mxu0 %v3359
  %5747 = vmatmul.mubr.bf16.gmra.mrb[0].mxu0 %v3356
  %v5748 = vpop.f32.mrb[0].mxu0
  %v5749 = vadd.f32 0.0, %v5748
  %v5750 = vpop.f32.mrb[0].mxu0
  %v5751 = vpop.f32.mrb[0].mxu0
  %v5752 = vadd.f32 0.0, %v5751
  %v5753 = vpop.f32.mrb[0].mxu0
  %5754 = vmatprep.mubr.bf16.mxu0 %v3374
  %5755 = vmatmul.mubr.bf16.gmra.mrb[0].mxu0 %v3371
  %v5756 = vpop.f32.mrb[0].mxu0
  %v5757 = vadd.f32 0.0, %v5756
  %v5758 = vpop.f32.mrb[0].mxu0
  %v5759 = vpop.f32.mrb[0].mxu0
  %v5760 = vadd.f32 0.0, %v5759
  %v5761 = vpop.f32.mrb[0].mxu0
  %5762 = vmatprep.mubr.bf16.mxu0 %v3389
  %5763 = vmatmul.mubr.bf16.gmra.mrb[0].mxu0 %v3386
  %v5764 = vpop.f32.mrb[0].mxu0
  %v5765 = vadd.f32 0.0, %v5764
  %v5766 = vpop.f32.mrb[0].mxu0
  %v5767 = vpop.f32.mrb[0].mxu0
  %v5768 = vadd.f32 0.0, %v5767
  %v5769 = vpop.f32.mrb[0].mxu0
  %5770 = vmatprep.mubr.bf16.mxu0 %v3404
  %5771 = vmatmul.mubr.bf16.gmra.mrb[0].mxu0 %v3401
  %v5772 = vpop.f32.mrb[0].mxu0
  %v5773 = vadd.f32 0.0, %v5772
  %v5774 = vpop.f32.mrb[0].mxu0
  %v5775 = vpop.f32.mrb[0].mxu0
  %v5776 = vadd.f32 0.0, %v5775
  %v5777 = vpop.f32.mrb[0].mxu0
  %5778 = vmatprep.mubr.bf16.mxu0 %v3419
  %5779 = vmatmul.mubr.bf16.gmra.mrb[0].mxu0 %v3416
  %v5780 = vpop.f32.mrb[0].mxu0
  %v5781 = vadd.f32 0.0, %v5780
  %v5782 = vpop.f32.mrb[0].mxu0
  %v5783 = vpop.f32.mrb[0].mxu0
  %v5784 = vadd.f32 0.0, %v5783
  %v5785 = vpop.f32.mrb[0].mxu0
  %5786 = vmatprep.mubr.bf16.mxu0 %v3434
  %5787 = vmatmul.mubr.bf16.gmra.mrb[0].mxu0 %v3431
  %v5788 = vpop.f32.mrb[0].mxu0
  %v5789 = vadd.f32 0.0, %v5788
  %v5790 = vpop.f32.mrb[0].mxu0
  %v5791 = vpop.f32.mrb[0].mxu0
  %v5792 = vadd.f32 0.0, %v5791
  %v5793 = vpop.f32.mrb[0].mxu0
  %5794 = vmatprep.mubr.bf16.mxu0 %v3449
  %5795 = vmatmul.mubr.bf16.gmra.mrb[0].mxu0 %v3446
  %v5796 = vpop.f32.mrb[0].mxu0
  %v5797 = vadd.f32 0.0, %v5796
  %v5798 = vpop.f32.mrb[0].mxu0
  %v5799 = vpop.f32.mrb[0].mxu0
  %v5800 = vadd.f32 0.0, %v5799
  %v5801 = vpop.f32.mrb[0].mxu0
  %5802 = vdwg.mxu0
  %5803 = vmatprep.subr.bf16.mxu0 0
  %5804 = vmatpush1.bf16.msra.mxu0 %v5546
  %5805 = vmatprep.subr.bf16.mxu0 0
  %5806 = vmatpush1.bf16.msra.mxu0 %v5547
  %5807 = vmatprep.subr.bf16.mxu0 0
  %5808 = vmatpush1.bf16.msra.mxu0 %v5548
  %5809 = vmatprep.subr.bf16.mxu0 0
  %5810 = vmatpush1.bf16.msra.mxu0 %v5549
  %5811 = vmatprep.subr.bf16.mxu0 0
  %5812 = vmatpush1.bf16.msra.mxu0 %v5550
  %5813 = vmatprep.subr.bf16.mxu0 0
  %5814 = vmatpush1.bf16.msra.mxu0 %v5551
  %5815 = vmatprep.subr.bf16.mxu0 0
  %5816 = vmatpush1.bf16.msra.mxu0 %v5552
  %5817 = vmatprep.subr.bf16.mxu0 0
  %5818 = vmatpush1.bf16.msra.mxu0 %v5553
  %5819 = vmatprep.subr.bf16.mxu0 0
  %5820 = vmatpush1.bf16.msra.mxu0 %v5554
  %5821 = vmatprep.subr.bf16.mxu0 0
  %5822 = vmatpush1.bf16.msra.mxu0 %v5555
  %5823 = vmatprep.subr.bf16.mxu0 0
  %5824 = vmatpush1.bf16.msra.mxu0 %v5556
  %5825 = vmatprep.subr.bf16.mxu0 0
  %5826 = vmatpush1.bf16.msra.mxu0 %v5557
  %5827 = vmatprep.subr.bf16.mxu0 0
  %5828 = vmatpush1.bf16.msra.mxu0 %v5558
  %5829 = vmatprep.subr.bf16.mxu0 0
  %5830 = vmatpush1.bf16.msra.mxu0 %v5559
  %5831 = vmatprep.subr.bf16.mxu0 0
  %5832 = vmatpush1.bf16.msra.mxu0 %v5560
  %5833 = vmatprep.subr.bf16.mxu0 0
  %5834 = vmatpush1.bf16.msra.mxu0 %v5561
  %5835 = vmatprep.mubr.bf16.mxu0 %v3110
  %5836 = vmatmul.mubr.bf16.gmra.mrb[0].mxu0 %v3107
  %v5837 = vpop.f32.mrb[0].mxu0
  %v5838 = vadd.f32 %v5645, %v5837
  %v5839 = vpop.f32.mrb[0].mxu0
  %v5840 = vpop.f32.mrb[0].mxu0
  %v5841 = vadd.f32 %v5648, %v5840
  %v5842 = vpop.f32.mrb[0].mxu0
  %5843 = vmatprep.mubr.bf16.mxu0 %v3125
  %5844 = vmatmul.mubr.bf16.gmra.mrb[0].mxu0 %v3122
  %v5845 = vpop.f32.mrb[0].mxu0
  %v5846 = vadd.f32 %v5653, %v5845
  %v5847 = vpop.f32.mrb[0].mxu0
  %v5848 = vpop.f32.mrb[0].mxu0
  %v5849 = vadd.f32 %v5656, %v5848
  %v5850 = vpop.f32.mrb[0].mxu0
  %5851 = vmatprep.mubr.bf16.mxu0 %v3140
  %5852 = vmatmul.mubr.bf16.gmra.mrb[0].mxu0 %v3137
  %v5853 = vpop.f32.mrb[0].mxu0
  %v5854 = vadd.f32 %v5661, %v5853
  %v5855 = vpop.f32.mrb[0].mxu0
  %v5856 = vpop.f32.mrb[0].mxu0
  %v5857 = vadd.f32 %v5664, %v5856
  %v5858 = vpop.f32.mrb[0].mxu0
  %5859 = vmatprep.mubr.bf16.mxu0 %v3155
  %5860 = vmatmul.mubr.bf16.gmra.mrb[0].mxu0 %v3152
  %v5861 = vpop.f32.mrb[0].mxu0
  %v5862 = vadd.f32 %v5669, %v5861
  %v5863 = vpop.f32.mrb[0].mxu0
  %v5864 = vpop.f32.mrb[0].mxu0
  %v5865 = vadd.f32 %v5672, %v5864
  %v5866 = vpop.f32.mrb[0].mxu0
  %5867 = vmatprep.mubr.bf16.mxu0 %v3170
  %5868 = vmatmul.mubr.bf16.gmra.mrb[0].mxu0 %v3167
  %v5869 = vpop.f32.mrb[0].mxu0
  %v5870 = vadd.f32 %v5677, %v5869
  %v5871 = vpop.f32.mrb[0].mxu0
  %v5872 = vpop.f32.mrb[0].mxu0
  %v5873 = vadd.f32 %v5680, %v5872
  %v5874 = vpop.f32.mrb[0].mxu0
  %5875 = vmatprep.mubr.bf16.mxu0 %v3185
  %5876 = vmatmul.mubr.bf16.gmra.mrb[0].mxu0 %v3182
  %v5877 = vpop.f32.mrb[0].mxu0
  %v5878 = vadd.f32 %v5685, %v5877
  %v5879 = vpop.f32.mrb[0].mxu0
  %v5880 = vpop.f32.mrb[0].mxu0
  %v5881 = vadd.f32 %v5688, %v5880
  %v5882 = vpop.f32.mrb[0].mxu0
  %5883 = vmatprep.mubr.bf16.mxu0 %v3200
  %5884 = vmatmul.mubr.bf16.gmra.mrb[0].mxu0 %v3197
  %v5885 = vpop.f32.mrb[0].mxu0
  %v5886 = vadd.f32 %v5693, %v5885
  %v5887 = vpop.f32.mrb[0].mxu0
  %v5888 = vpop.f32.mrb[0].mxu0
  %v5889 = vadd.f32 %v5696, %v5888
  %v5890 = vpop.f32.mrb[0].mxu0
  %5891 = vmatprep.mubr.bf16.mxu0 %v3215
  %5892 = vmatmul.mubr.bf16.gmra.mrb[0].mxu0 %v3212
  %v5893 = vpop.f32.mrb[0].mxu0
  %v5894 = vadd.f32 %v5701, %v5893
  %v5895 = vpop.f32.mrb[0].mxu0
  %v5896 = vpop.f32.mrb[0].mxu0
  %v5897 = vadd.f32 %v5704, %v5896
  %v5898 = vpop.f32.mrb[0].mxu0
  %5899 = vmatprep.mubr.bf16.mxu0 %v3230
  %5900 = vmatmul.mubr.bf16.gmra.mrb[0].mxu0 %v3227
  %v5901 = vpop.f32.mrb[0].mxu0
  %v5902 = vadd.f32 %v5709, %v5901
  %v5903 = vpop.f32.mrb[0].mxu0
  %v5904 = vpop.f32.mrb[0].mxu0
  %v5905 = vadd.f32 %v5712, %v5904
  %v5906 = vpop.f32.mrb[0].mxu0
  %5907 = vmatprep.mubr.bf16.mxu0 %v3245
  %5908 = vmatmul.mubr.bf16.gmra.mrb[0].mxu0 %v3242
  %v5909 = vpop.f32.mrb[0].mxu0
  %v5910 = vadd.f32 %v5717, %v5909
  %v5911 = vpop.f32.mrb[0].mxu0
  %v5912 = vpop.f32.mrb[0].mxu0
  %v5913 = vadd.f32 %v5720, %v5912
  %v5914 = vpop.f32.mrb[0].mxu0
  %5915 = vmatprep.mubr.bf16.mxu0 %v3320
  %5916 = vmatmul.mubr.bf16.gmra.mrb[0].mxu0 %v3317
  %v5917 = vpop.f32.mrb[0].mxu0
  %v5918 = vadd.f32 %v5725, %v5917
  %v5919 = vpop.f32.mrb[0].mxu0
  %v5920 = vpop.f32.mrb[0].mxu0
  %v5921 = vadd.f32 %v5728, %v5920
  %v5922 = vpop.f32.mrb[0].mxu0
  %5923 = vmatprep.mubr.bf16.mxu0 %v3335
  %5924 = vmatmul.mubr.bf16.gmra.mrb[0].mxu0 %v3332
  %v5925 = vpop.f32.mrb[0].mxu0
  %v5926 = vadd.f32 %v5733, %v5925
  %v5927 = vpop.f32.mrb[0].mxu0
  %v5928 = vpop.f32.mrb[0].mxu0
  %v5929 = vadd.f32 %v5736, %v5928
  %v5930 = vpop.f32.mrb[0].mxu0
  %5931 = vmatprep.mubr.bf16.mxu0 %v3350
  %5932 = vmatmul.mubr.bf16.gmra.mrb[0].mxu0 %v3347
  %v5933 = vpop.f32.mrb[0].mxu0
  %v5934 = vadd.f32 %v5741, %v5933
  %v5935 = vpop.f32.mrb[0].mxu0
  %v5936 = vpop.f32.mrb[0].mxu0
  %v5937 = vadd.f32 %v5744, %v5936
  %v5938 = vpop.f32.mrb[0].mxu0
  %5939 = vmatprep.mubr.bf16.mxu0 %v3365
  %5940 = vmatmul.mubr.bf16.gmra.mrb[0].mxu0 %v3362
  %v5941 = vpop.f32.mrb[0].mxu0
  %v5942 = vadd.f32 %v5749, %v5941
  %v5943 = vpop.f32.mrb[0].mxu0
  %v5944 = vpop.f32.mrb[0].mxu0
  %v5945 = vadd.f32 %v5752, %v5944
  %v5946 = vpop.f32.mrb[0].mxu0
  %5947 = vmatprep.mubr.bf16.mxu0 %v3380
  %5948 = vmatmul.mubr.bf16.gmra.mrb[0].mxu0 %v3377
  %v5949 = vpop.f32.mrb[0].mxu0
  %v5950 = vadd.f32 %v5757, %v5949
  %v5951 = vpop.f32.mrb[0].mxu0
  %v5952 = vpop.f32.mrb[0].mxu0
  %v5953 = vadd.f32 %v5760, %v5952
  %v5954 = vpop.f32.mrb[0].mxu0
  %5955 = vmatprep.mubr.bf16.mxu0 %v3395
  %5956 = vmatmul.mubr.bf16.gmra.mrb[0].mxu0 %v3392
  %v5957 = vpop.f32.mrb[0].mxu0
  %v5958 = vadd.f32 %v5765, %v5957
  %v5959 = vpop.f32.mrb[0].mxu0
  %v5960 = vpop.f32.mrb[0].mxu0
  %v5961 = vadd.f32 %v5768, %v5960
  %v5962 = vpop.f32.mrb[0].mxu0
  %5963 = vmatprep.mubr.bf16.mxu0 %v3410
  %5964 = vmatmul.mubr.bf16.gmra.mrb[0].mxu0 %v3407
  %v5965 = vpop.f32.mrb[0].mxu0
  %v5966 = vadd.f32 %v5773, %v5965
  %v5967 = vpop.f32.mrb[0].mxu0
  %v5968 = vpop.f32.mrb[0].mxu0
  %v5969 = vadd.f32 %v5776, %v5968
  %v5970 = vpop.f32.mrb[0].mxu0
  %5971 = vmatprep.mubr.bf16.mxu0 %v3425
  %5972 = vmatmul.mubr.bf16.gmra.mrb[0].mxu0 %v3422
  %v5973 = vpop.f32.mrb[0].mxu0
  %v5974 = vadd.f32 %v5781, %v5973
  %v5975 = vpop.f32.mrb[0].mxu0
  %v5976 = vpop.f32.mrb[0].mxu0
  %v5977 = vadd.f32 %v5784, %v5976
  %v5978 = vpop.f32.mrb[0].mxu0
  %5979 = vmatprep.mubr.bf16.mxu0 %v3440
  %5980 = vmatmul.mubr.bf16.gmra.mrb[0].mxu0 %v3437
  %v5981 = vpop.f32.mrb[0].mxu0
  %v5982 = vadd.f32 %v5789, %v5981
  %v5983 = vpop.f32.mrb[0].mxu0
  %v5984 = vpop.f32.mrb[0].mxu0
  %v5985 = vadd.f32 %v5792, %v5984
  %v5986 = vpop.f32.mrb[0].mxu0
  %5987 = vmatprep.mubr.bf16.mxu0 %v3455
  %5988 = vmatmul.mubr.bf16.gmra.mrb[0].mxu0 %v3452
  %v5989 = vpop.f32.mrb[0].mxu0
  %v5990 = vadd.f32 %v5797, %v5989
  %v5991 = vpop.f32.mrb[0].mxu0
  %v5992 = vpop.f32.mrb[0].mxu0
  %v5993 = vadd.f32 %v5800, %v5992
  %v5994 = vpop.f32.mrb[0].mxu0
  %5995 = vdwg.mxu0
  %5996 = vmatprep.subr.bf16.mxu0 0
  %5997 = vmatpush1.bf16.msra.mxu0 %v5562
  %5998 = vmatprep.subr.bf16.mxu0 0
  %5999 = vmatpush1.bf16.msra.mxu0 %v5563
  %6000 = vmatprep.subr.bf16.mxu0 0
  %6001 = vmatpush1.bf16.msra.mxu0 %v5564
  %6002 = vmatprep.subr.bf16.mxu0 0
  %6003 = vmatpush1.bf16.msra.mxu0 %v5565
  %6004 = vmatprep.subr.bf16.mxu0 0
  %6005 = vmatpush1.bf16.msra.mxu0 %v5566
  %6006 = vmatprep.subr.bf16.mxu0 0
  %6007 = vmatpush1.bf16.msra.mxu0 %v5567
  %6008 = vmatprep.subr.bf16.mxu0 0
  %6009 = vmatpush1.bf16.msra.mxu0 %v5568
  %6010 = vmatprep.subr.bf16.mxu0 0
  %6011 = vmatpush1.bf16.msra.mxu0 %v5569
  %6012 = vmatprep.subr.bf16.mxu0 0
  %6013 = vmatpush1.bf16.msra.mxu0 0
  %6014 = vmatprep.subr.bf16.mxu0 0
  %6015 = vmatpush1.bf16.msra.mxu0 0
  %6016 = vmatprep.subr.bf16.mxu0 0
  %6017 = vmatpush1.bf16.msra.mxu0 0
  %6018 = vmatprep.subr.bf16.mxu0 0
  %6019 = vmatpush1.bf16.msra.mxu0 0
  %6020 = vmatprep.subr.bf16.mxu0 0
  %6021 = vmatpush1.bf16.msra.mxu0 0
  %6022 = vmatprep.subr.bf16.mxu0 0
  %6023 = vmatpush1.bf16.msra.mxu0 0
  %6024 = vmatprep.subr.bf16.mxu0 0
  %6025 = vmatpush1.bf16.msra.mxu0 0
  %6026 = vmatprep.subr.bf16.mxu0 0
  %6027 = vmatpush1.bf16.msra.mxu0 0
  %6028 = vmatprep.mubr.bf16.mxu0 0
  %6029 = vmatmul.mubr.bf16.gmra.mrb[0].mxu0 %v3113
  %v6030 = vpop.f32.mrb[0].mxu0
  %v6031 = vadd.f32 %v5838, %v6030
  %v6032 = vpop.f32.mrb[0].mxu0
  %v6033 = vpop.f32.mrb[0].mxu0
  %v6034 = vadd.f32 %v5841, %v6033
  %v6035 = vpop.f32.mrb[0].mxu0
  %6036 = vmatprep.mubr.bf16.mxu0 0
  %6037 = vmatmul.mubr.bf16.gmra.mrb[0].mxu0 %v3128
  %v6038 = vpop.f32.mrb[0].mxu0
  %v6039 = vadd.f32 %v5846, %v6038
  %v6040 = vpop.f32.mrb[0].mxu0
  %v6041 = vpop.f32.mrb[0].mxu0
  %v6042 = vadd.f32 %v5849, %v6041
  %v6043 = vpop.f32.mrb[0].mxu0
  %6044 = vmatprep.mubr.bf16.mxu0 0
  %6045 = vmatmul.mubr.bf16.gmra.mrb[0].mxu0 %v3143
  %v6046 = vpop.f32.mrb[0].mxu0
  %v6047 = vadd.f32 %v5854, %v6046
  %v6048 = vpop.f32.mrb[0].mxu0
  %v6049 = vpop.f32.mrb[0].mxu0
  %v6050 = vadd.f32 %v5857, %v6049
  %v6051 = vpop.f32.mrb[0].mxu0
  %6052 = vmatprep.mubr.bf16.mxu0 0
  %6053 = vmatmul.mubr.bf16.gmra.mrb[0].mxu0 %v3158
  %v6054 = vpop.f32.mrb[0].mxu0
  %v6055 = vadd.f32 %v5862, %v6054
  %v6056 = vpop.f32.mrb[0].mxu0
  %v6057 = vpop.f32.mrb[0].mxu0
  %v6058 = vadd.f32 %v5865, %v6057
  %v6059 = vpop.f32.mrb[0].mxu0
  %6060 = vmatprep.mubr.bf16.mxu0 0
  %6061 = vmatmul.mubr.bf16.gmra.mrb[0].mxu0 %v3173
  %v6062 = vpop.f32.mrb[0].mxu0
  %v6063 = vadd.f32 %v5870, %v6062
  %v6064 = vpop.f32.mrb[0].mxu0
  %v6065 = vpop.f32.mrb[0].mxu0
  %v6066 = vadd.f32 %v5873, %v6065
  %v6067 = vpop.f32.mrb[0].mxu0
  %6068 = vmatprep.mubr.bf16.mxu0 0
  %6069 = vmatmul.mubr.bf16.gmra.mrb[0].mxu0 %v3188
  %v6070 = vpop.f32.mrb[0].mxu0
  %v6071 = vadd.f32 %v5878, %v6070
  %v6072 = vpop.f32.mrb[0].mxu0
  %v6073 = vpop.f32.mrb[0].mxu0
  %v6074 = vadd.f32 %v5881, %v6073
  %v6075 = vpop.f32.mrb[0].mxu0
  %6076 = vmatprep.mubr.bf16.mxu0 0
  %6077 = vmatmul.mubr.bf16.gmra.mrb[0].mxu0 %v3203
  %v6078 = vpop.f32.mrb[0].mxu0
  %v6079 = vadd.f32 %v5886, %v6078
  %v6080 = vpop.f32.mrb[0].mxu0
  %v6081 = vpop.f32.mrb[0].mxu0
  %v6082 = vadd.f32 %v5889, %v6081
  %v6083 = vpop.f32.mrb[0].mxu0
  %6084 = vmatprep.mubr.bf16.mxu0 0
  %6085 = vmatmul.mubr.bf16.gmra.mrb[0].mxu0 %v3218
  %v6086 = vpop.f32.mrb[0].mxu0
  %v6087 = vadd.f32 %v5894, %v6086
  %v6088 = vpop.f32.mrb[0].mxu0
  %v6089 = vpop.f32.mrb[0].mxu0
  %v6090 = vadd.f32 %v5897, %v6089
  %v6091 = vpop.f32.mrb[0].mxu0
  %6092 = vmatprep.mubr.bf16.mxu0 0
  %6093 = vmatmul.mubr.bf16.gmra.mrb[0].mxu0 %v3233
  %v6094 = vpop.f32.mrb[0].mxu0
  %v6095 = vadd.f32 %v5902, %v6094
  %v6096 = vpop.f32.mrb[0].mxu0
  %v6097 = vpop.f32.mrb[0].mxu0
  %v6098 = vadd.f32 %v5905, %v6097
  %v6099 = vpop.f32.mrb[0].mxu0
  %6100 = vmatprep.mubr.bf16.mxu0 0
  %6101 = vmatmul.mubr.bf16.gmra.mrb[0].mxu0 %v3248
  %v6102 = vpop.f32.mrb[0].mxu0
  %v6103 = vadd.f32 %v5910, %v6102
  %v6104 = vpop.f32.mrb[0].mxu0
  %v6105 = vpop.f32.mrb[0].mxu0
  %v6106 = vadd.f32 %v5913, %v6105
  %v6107 = vpop.f32.mrb[0].mxu0
  %6108 = vmatprep.mubr.bf16.mxu0 0
  %6109 = vmatmul.mubr.bf16.gmra.mrb[0].mxu0 %v3323
  %v6110 = vpop.f32.mrb[0].mxu0
  %v6111 = vadd.f32 %v5918, %v6110
  %v6112 = vpop.f32.mrb[0].mxu0
  %v6113 = vpop.f32.mrb[0].mxu0
  %v6114 = vadd.f32 %v5921, %v6113
  %v6115 = vpop.f32.mrb[0].mxu0
  %6116 = vmatprep.mubr.bf16.mxu0 0
  %6117 = vmatmul.mubr.bf16.gmra.mrb[0].mxu0 %v3338
  %v6118 = vpop.f32.mrb[0].mxu0
  %v6119 = vadd.f32 %v5926, %v6118
  %v6120 = vpop.f32.mrb[0].mxu0
  %v6121 = vpop.f32.mrb[0].mxu0
  %v6122 = vadd.f32 %v5929, %v6121
  %v6123 = vpop.f32.mrb[0].mxu0
  %6124 = vmatprep.mubr.bf16.mxu0 0
  %6125 = vmatmul.mubr.bf16.gmra.mrb[0].mxu0 %v3353
  %v6126 = vpop.f32.mrb[0].mxu0
  %v6127 = vadd.f32 %v5934, %v6126
  %v6128 = vpop.f32.mrb[0].mxu0
  %v6129 = vpop.f32.mrb[0].mxu0
  %v6130 = vadd.f32 %v5937, %v6129
  %v6131 = vpop.f32.mrb[0].mxu0
  %6132 = vmatprep.mubr.bf16.mxu0 0
  %6133 = vmatmul.mubr.bf16.gmra.mrb[0].mxu0 %v3368
  %v6134 = vpop.f32.mrb[0].mxu0
  %v6135 = vadd.f32 %v5942, %v6134
  %v6136 = vpop.f32.mrb[0].mxu0
  %v6137 = vpop.f32.mrb[0].mxu0
  %v6138 = vadd.f32 %v5945, %v6137
  %v6139 = vpop.f32.mrb[0].mxu0
  %6140 = vmatprep.mubr.bf16.mxu0 0
  %6141 = vmatmul.mubr.bf16.gmra.mrb[0].mxu0 %v3383
  %v6142 = vpop.f32.mrb[0].mxu0
  %v6143 = vadd.f32 %v5950, %v6142
  %v6144 = vpop.f32.mrb[0].mxu0
  %v6145 = vpop.f32.mrb[0].mxu0
  %v6146 = vadd.f32 %v5953, %v6145
  %v6147 = vpop.f32.mrb[0].mxu0
  %6148 = vmatprep.mubr.bf16.mxu0 0
  %6149 = vmatmul.mubr.bf16.gmra.mrb[0].mxu0 %v3398
  %v6150 = vpop.f32.mrb[0].mxu0
  %v6151 = vadd.f32 %v5958, %v6150
  %v6152 = vpop.f32.mrb[0].mxu0
  %v6153 = vpop.f32.mrb[0].mxu0
  %v6154 = vadd.f32 %v5961, %v6153
  %v6155 = vpop.f32.mrb[0].mxu0
  %6156 = vmatprep.mubr.bf16.mxu0 0
  %6157 = vmatmul.mubr.bf16.gmra.mrb[0].mxu0 %v3413
  %v6158 = vpop.f32.mrb[0].mxu0
  %v6159 = vadd.f32 %v5966, %v6158
  %v6160 = vpop.f32.mrb[0].mxu0
  %v6161 = vpop.f32.mrb[0].mxu0
  %v6162 = vadd.f32 %v5969, %v6161
  %v6163 = vpop.f32.mrb[0].mxu0
  %6164 = vmatprep.mubr.bf16.mxu0 0
  %6165 = vmatmul.mubr.bf16.gmra.mrb[0].mxu0 %v3428
  %v6166 = vpop.f32.mrb[0].mxu0
  %v6167 = vadd.f32 %v5974, %v6166
  %v6168 = vpop.f32.mrb[0].mxu0
  %v6169 = vpop.f32.mrb[0].mxu0
  %v6170 = vadd.f32 %v5977, %v6169
  %v6171 = vpop.f32.mrb[0].mxu0
  %6172 = vmatprep.mubr.bf16.mxu0 0
  %6173 = vmatmul.mubr.bf16.gmra.mrb[0].mxu0 %v3443
  %v6174 = vpop.f32.mrb[0].mxu0
  %v6175 = vadd.f32 %v5982, %v6174
  %v6176 = vpop.f32.mrb[0].mxu0
  %v6177 = vpop.f32.mrb[0].mxu0
  %v6178 = vadd.f32 %v5985, %v6177
  %v6179 = vpop.f32.mrb[0].mxu0
  %6180 = vmatprep.mubr.bf16.mxu0 0
  %6181 = vmatmul.mubr.bf16.gmra.mrb[0].mxu0 %v3458
  %v6182 = vpop.f32.mrb[0].mxu0
  %v6183 = vadd.f32 %v5990, %v6182
  %v6184 = vpop.f32.mrb[0].mxu0
  %v6185 = vpop.f32.mrb[0].mxu0
  %v6186 = vadd.f32 %v5993, %v6185
  %v6187 = vpop.f32.mrb[0].mxu0
  %6188 = vdwg.mxu0
  %v6189 = vadd.f32 %v5131, %v6031
  %v6190 = vadd.f32 %v5134, %v6034
  %v6191 = vadd.f32 %v5139, %v6039
  %v6192 = vadd.f32 %v5142, %v6042
  %v6193 = vadd.f32 %v5147, %v6047
  %v6194 = vadd.f32 %v5150, %v6050
  %v6195 = vadd.f32 %v5155, %v6055
  %v6196 = vadd.f32 %v5158, %v6058
  %v6197 = vadd.f32 %v5163, %v6063
  %v6198 = vadd.f32 %v5166, %v6066
  %v6199 = vadd.f32 %v5171, %v6071
  %v6200 = vadd.f32 %v5174, %v6074
  %v6201 = vadd.f32 %v5179, %v6079
  %v6202 = vadd.f32 %v5182, %v6082
  %v6203 = vadd.f32 %v5187, %v6087
  %v6204 = vadd.f32 %v5190, %v6090
  %v6205 = vadd.f32 %v5195, %v6095
  %v6206 = vadd.f32 %v5198, %v6098
  %v6207 = vadd.f32 %v5203, %v6103
  %v6208 = vadd.f32 %v5206, %v6106
  %v6209 = vadd.f32 %v5211, %v6111
  %v6210 = vadd.f32 %v5214, %v6114
  %v6211 = vadd.f32 %v5219, %v6119
  %v6212 = vadd.f32 %v5222, %v6122
  %v6213 = vadd.f32 %v5227, %v6127
  %v6214 = vadd.f32 %v5230, %v6130
  %v6215 = vadd.f32 %v5235, %v6135
  %v6216 = vadd.f32 %v5238, %v6138
  %v6217 = vadd.f32 %v5243, %v6143
  %v6218 = vadd.f32 %v5246, %v6146
  %v6219 = vadd.f32 %v5251, %v6151
  %v6220 = vadd.f32 %v5254, %v6154
  %v6221 = vadd.f32 %v5259, %v6159
  %v6222 = vadd.f32 %v5262, %v6162
  %v6223 = vadd.f32 %v5267, %v6167
  %v6224 = vadd.f32 %v5270, %v6170
  %v6225 = vadd.f32 %v5275, %v6175
  %v6226 = vadd.f32 %v5278, %v6178
  %v6227 = vadd.f32 %v5283, %v6183
  %v6228 = vadd.f32 %v5286, %v6186
  %s6229 = scalar_lea.vmem %s3, 960
  %v6230 = vld [vmem:[%s6229] sm:$0xf]
  %v6231 = vld [vmem:[%s6229 + $0x4] sm:$0xf]
  %v6232 = vld [vmem:[%s6229 + $0x8] sm:$0xf]
  %v6233 = vld [vmem:[%s6229 + $0xc] sm:$0xf]
  %v6234 = vld [vmem:[%s6229 + $0x10] sm:$0xf]
  %v6235 = vld [vmem:[%s6229 + $0x14] sm:$0xf]
  %v6236 = vld [vmem:[%s6229 + $0x18] sm:$0xf]
  %v6237 = vld [vmem:[%s6229 + $0x1c] sm:$0xf]
  %v6238 = vld [vmem:[%s6229 + $0x20] sm:$0xf]
  %v6239 = vld [vmem:[%s6229 + $0x24] sm:$0xf]
  %v6240 = vld [vmem:[%s6229 + $0x28] sm:$0xf]
  %v6241 = vld [vmem:[%s6229 + $0x2c] sm:$0xf]
  %v6242 = vld [vmem:[%s6229 + $0x30] sm:$0xf]
  %v6243 = vld [vmem:[%s6229 + $0x34] sm:$0xf]
  %v6244 = vld [vmem:[%s6229 + $0x38] sm:$0xf]
  %v6245 = vld [vmem:[%s6229 + $0x3c] sm:$0xf]
  %v6246 = vld [vmem:[%s6229 + $0x40] sm:$0xf]
  %v6247 = vld [vmem:[%s6229 + $0x44] sm:$0xf]
  %v6248 = vld [vmem:[%s6229 + $0x48] sm:$0xf]
  %v6249 = vld [vmem:[%s6229 + $0x4c] sm:$0xf]
  %v6250 = vld [vmem:[%s6229 + $0x50] sm:$0xf]
  %v6251 = vld [vmem:[%s6229 + $0x54] sm:$0xf]
  %v6252 = vld [vmem:[%s6229 + $0x58] sm:$0xf]
  %v6253 = vld [vmem:[%s6229 + $0x5c] sm:$0xf]
  %v6254 = vld [vmem:[%s6229 + $0x60] sm:$0xf]
  %v6255 = vld [vmem:[%s6229 + $0x64] sm:$0xf]
  %v6256 = vld [vmem:[%s6229 + $0x68] sm:$0xf]
  %v6257 = vld [vmem:[%s6229 + $0x6c] sm:$0xf]
  %v6258 = vld [vmem:[%s6229 + $0x70] sm:$0xf]
  %v6259 = vld [vmem:[%s6229 + $0x74] sm:$0xf]
  %v6260 = vld [vmem:[%s6229 + $0x78] sm:$0xf]
  %v6261 = vld [vmem:[%s6229 + $0x7c] sm:$0xf]
  %v6262 = vld [vmem:[%s6229 + $0x80] sm:$0xf]
  %v6263 = vld [vmem:[%s6229 + $0x84] sm:$0xf]
  %v6264 = vld [vmem:[%s6229 + $0x88] sm:$0xf]
  %v6265 = vld [vmem:[%s6229 + $0x8c] sm:$0xf]
  %v6266 = vld [vmem:[%s6229 + $0x90] sm:$0xf]
  %v6267 = vld [vmem:[%s6229 + $0x94] sm:$0xf]
  %v6268 = vld [vmem:[%s6229 + $0x98] sm:$0xf]
  %v6269 = vld [vmem:[%s6229 + $0x9c] sm:$0xf]
  %v6270 = vld [vmem:[%s6229 + $0xa0] sm:$0xf]
  %v6271 = vld [vmem:[%s6229 + $0xa4] sm:$0xf]
  %v6272 = vld [vmem:[%s6229 + $0xa8] sm:$0xf]
  %v6273 = vld [vmem:[%s6229 + $0xac] sm:$0xf]
  %v6274 = vld [vmem:[%s6229 + $0xb0] sm:$0xf]
  %v6275 = vld [vmem:[%s6229 + $0xb4] sm:$0xf]
  %v6276 = vld [vmem:[%s6229 + $0xb8] sm:$0xf]
  %v6277 = vld [vmem:[%s6229 + $0xbc] sm:$0xf]
  %v6278 = vld [vmem:[%s6229 + $0xc0] sm:$0xf]
  %v6279 = vld [vmem:[%s6229 + $0xc4] sm:$0xf]
  %v6280 = vld [vmem:[%s6229 + $0xc8] sm:$0xf]
  %v6281 = vld [vmem:[%s6229 + $0xcc] sm:$0xf]
  %v6282 = vld [vmem:[%s6229 + $0xd0] sm:$0xf]
  %v6283 = vld [vmem:[%s6229 + $0xd4] sm:$0xf]
  %v6284 = vld [vmem:[%s6229 + $0xd8] sm:$0xf]
  %v6285 = vld [vmem:[%s6229 + $0xdc] sm:$0xf]
  %v6286 = vld [vmem:[%s6229 + $0xe0] sm:$0xf]
  %v6287 = vld [vmem:[%s6229 + $0xe4] sm:$0xf]
  %v6288 = vld [vmem:[%s6229 + $0xe8] sm:$0xf]
  %v6289 = vld [vmem:[%s6229 + $0xec] sm:$0xf]
  %v6290 = vld [vmem:[%s6229 + $0xf0] sm:$0xf]
  %v6291 = vld [vmem:[%s6229 + $0xf4] sm:$0xf]
  %v6292 = vld [vmem:[%s6229 + $0xf8] sm:$0xf]
  %v6293 = vld [vmem:[%s6229 + $0xfc] sm:$0xf]
  %v6294 = vld [vmem:[%s6229 + $0x100] sm:$0xf]
  %v6295 = vld [vmem:[%s6229 + $0x104] sm:$0xf]
  %v6296 = vld [vmem:[%s6229 + $0x108] sm:$0xf]
  %v6297 = vld [vmem:[%s6229 + $0x10c] sm:$0xf]
  %v6298 = vld [vmem:[%s6229 + $0x110] sm:$0xf]
  %v6299 = vld [vmem:[%s6229 + $0x114] sm:$0xf]
  %v6300 = vld [vmem:[%s6229 + $0x118] sm:$0xf]
  %v6301 = vld [vmem:[%s6229 + $0x11c] sm:$0xf]
  %v6302 = vld [vmem:[%s6229 + $0x120] sm:$0xf]
  %v6303 = vld [vmem:[%s6229 + $0x124] sm:$0xf]
  %v6304 = vld [vmem:[%s6229 + $0x128] sm:$0xf]
  %v6305 = vld [vmem:[%s6229 + $0x12c] sm:$0xf]
  %v6306 = vld [vmem:[%s6229 + $0x130] sm:$0xf]
  %v6307 = vld [vmem:[%s6229 + $0x134] sm:$0xf]
  %v6308 = vld [vmem:[%s6229 + $0x138] sm:$0xf]
  %v6309 = vld [vmem:[%s6229 + $0x13c] sm:$0xf]
  %v6390 = vunpack.c.l.b16 %v6230
  %v6391 = vunpack.c.l.b16 %v6231
  %v6392 = vunpack.c.l.b16 %v6232
  %v6393 = vunpack.c.l.b16 %v6233
  %v6394 = vunpack.c.l.b16 %v6234
  %v6395 = vunpack.c.l.b16 %v6235
  %v6396 = vunpack.c.l.b16 %v6236
  %v6397 = vunpack.c.l.b16 %v6237
  %v6398 = vunpack.c.l.b16 %v6238
  %v6399 = vunpack.c.l.b16 %v6239
  %v6400 = vunpack.c.l.b16 %v6240
  %v6401 = vunpack.c.l.b16 %v6241
  %v6402 = vunpack.c.l.b16 %v6242
  %v6403 = vunpack.c.l.b16 %v6243
  %v6404 = vunpack.c.l.b16 %v6244
  %v6405 = vunpack.c.l.b16 %v6245
  %v6406 = vunpack.c.l.b16 %v6246
  %v6407 = vunpack.c.l.b16 %v6247
  %v6408 = vunpack.c.l.b16 %v6248
  %v6409 = vunpack.c.l.b16 %v6249
  %v6410 = vunpack.c.l.b16 %v6250
  %v6411 = vunpack.c.l.b16 %v6251
  %v6412 = vunpack.c.l.b16 %v6252
  %v6413 = vunpack.c.l.b16 %v6253
  %v6414 = vunpack.c.l.b16 %v6254
  %v6415 = vunpack.c.l.b16 %v6255
  %v6416 = vunpack.c.l.b16 %v6256
  %v6417 = vunpack.c.l.b16 %v6257
  %v6418 = vunpack.c.l.b16 %v6258
  %v6419 = vunpack.c.l.b16 %v6259
  %v6420 = vunpack.c.l.b16 %v6260
  %v6421 = vunpack.c.l.b16 %v6261
  %v6422 = vunpack.c.l.b16 %v6262
  %v6423 = vunpack.c.l.b16 %v6263
  %v6424 = vunpack.c.l.b16 %v6264
  %v6425 = vunpack.c.l.b16 %v6265
  %v6426 = vunpack.c.l.b16 %v6266
  %v6427 = vunpack.c.l.b16 %v6267
  %v6428 = vunpack.c.l.b16 %v6268
  %v6429 = vunpack.c.l.b16 %v6269
  %v6430 = vunpack.c.l.b16 %v6270
  %v6431 = vunpack.c.l.b16 %v6271
  %v6432 = vunpack.c.l.b16 %v6272
  %v6433 = vunpack.c.l.b16 %v6273
  %v6434 = vunpack.c.l.b16 %v6274
  %v6435 = vunpack.c.l.b16 %v6275
  %v6436 = vunpack.c.l.b16 %v6276
  %v6437 = vunpack.c.l.b16 %v6277
  %v6438 = vunpack.c.l.b16 %v6278
  %v6439 = vunpack.c.l.b16 %v6279
  %v6440 = vunpack.c.l.b16 %v6280
  %v6441 = vunpack.c.l.b16 %v6281
  %v6442 = vunpack.c.l.b16 %v6282
  %v6443 = vunpack.c.l.b16 %v6283
  %v6444 = vunpack.c.l.b16 %v6284
  %v6445 = vunpack.c.l.b16 %v6285
  %v6446 = vunpack.c.l.b16 %v6286
  %v6447 = vunpack.c.l.b16 %v6287
  %v6448 = vunpack.c.l.b16 %v6288
  %v6449 = vunpack.c.l.b16 %v6289
  %v6450 = vunpack.c.l.b16 %v6290
  %v6451 = vunpack.c.l.b16 %v6291
  %v6452 = vunpack.c.l.b16 %v6292
  %v6453 = vunpack.c.l.b16 %v6293
  %v6454 = vunpack.c.l.b16 %v6294
  %v6455 = vunpack.c.l.b16 %v6295
  %v6456 = vunpack.c.l.b16 %v6296
  %v6457 = vunpack.c.l.b16 %v6297
  %v6458 = vunpack.c.l.b16 %v6298
  %v6459 = vunpack.c.l.b16 %v6299
  %v6460 = vunpack.c.l.b16 %v6300
  %v6461 = vunpack.c.l.b16 %v6301
  %v6462 = vunpack.c.l.b16 %v6302
  %v6463 = vunpack.c.l.b16 %v6303
  %v6464 = vunpack.c.l.b16 %v6304
  %v6465 = vunpack.c.l.b16 %v6305
  %v6466 = vunpack.c.l.b16 %v6306
  %v6467 = vunpack.c.l.b16 %v6307
  %v6468 = vunpack.c.l.b16 %v6308
  %v6469 = vunpack.c.l.b16 %v6309
  %v6470 = vpack.c.b16 %v6391, %v6390
  %v6471 = vpack.c.b16 %v6393, %v6392
  %v6472 = vpack.c.b16 %v6395, %v6394
  %v6473 = vpack.c.b16 %v6397, %v6396
  %v6474 = vpack.c.b16 %v6399, %v6398
  %v6475 = vpack.c.b16 %v6401, %v6400
  %v6476 = vpack.c.b16 %v6403, %v6402
  %v6477 = vpack.c.b16 %v6405, %v6404
  %v6478 = vpack.c.b16 %v6407, %v6406
  %v6479 = vpack.c.b16 %v6409, %v6408
  %v6480 = vpack.c.b16 %v6411, %v6410
  %v6481 = vpack.c.b16 %v6413, %v6412
  %v6482 = vpack.c.b16 %v6415, %v6414
  %v6483 = vpack.c.b16 %v6417, %v6416
  %v6484 = vpack.c.b16 %v6419, %v6418
  %v6485 = vpack.c.b16 %v6421, %v6420
  %v6486 = vpack.c.b16 %v6423, %v6422
  %v6487 = vpack.c.b16 %v6425, %v6424
  %v6488 = vpack.c.b16 %v6427, %v6426
  %v6489 = vpack.c.b16 %v6429, %v6428
  %v6490 = vpack.c.b16 %v6431, %v6430
  %v6491 = vpack.c.b16 %v6433, %v6432
  %v6492 = vpack.c.b16 %v6435, %v6434
  %v6493 = vpack.c.b16 %v6437, %v6436
  %v6494 = vpack.c.b16 %v6439, %v6438
  %v6495 = vpack.c.b16 %v6441, %v6440
  %v6496 = vpack.c.b16 %v6443, %v6442
  %v6497 = vpack.c.b16 %v6445, %v6444
  %v6498 = vpack.c.b16 %v6447, %v6446
  %v6499 = vpack.c.b16 %v6449, %v6448
  %v6500 = vpack.c.b16 %v6451, %v6450
  %v6501 = vpack.c.b16 %v6453, %v6452
  %v6502 = vpack.c.b16 %v6455, %v6454
  %v6503 = vpack.c.b16 %v6457, %v6456
  %v6504 = vpack.c.b16 %v6459, %v6458
  %v6505 = vpack.c.b16 %v6461, %v6460
  %v6506 = vpack.c.b16 %v6463, %v6462
  %v6507 = vpack.c.b16 %v6465, %v6464
  %v6508 = vpack.c.b16 %v6467, %v6466
  %v6509 = vpack.c.b16 %v6469, %v6468
  %6550 = vmatprep.subr.bf16.mxu0 0
  %6551 = vmatpush1.bf16.msra.mxu0 %v6470
  %6552 = vmatprep.subr.bf16.mxu0 0
  %6553 = vmatpush1.bf16.msra.mxu0 %v6471
  %6554 = vmatprep.subr.bf16.mxu0 0
  %6555 = vmatpush1.bf16.msra.mxu0 %v6472
  %6556 = vmatprep.subr.bf16.mxu0 0
  %6557 = vmatpush1.bf16.msra.mxu0 %v6473
  %6558 = vmatprep.subr.bf16.mxu0 0
  %6559 = vmatpush1.bf16.msra.mxu0 %v6474
  %6560 = vmatprep.subr.bf16.mxu0 0
  %6561 = vmatpush1.bf16.msra.mxu0 %v6475
  %6562 = vmatprep.subr.bf16.mxu0 0
  %6563 = vmatpush1.bf16.msra.mxu0 %v6476
  %6564 = vmatprep.subr.bf16.mxu0 0
  %6565 = vmatpush1.bf16.msra.mxu0 %v6477
  %6566 = vmatprep.subr.bf16.mxu0 0
  %6567 = vmatpush1.bf16.msra.mxu0 %v6478
  %6568 = vmatprep.subr.bf16.mxu0 0
  %6569 = vmatpush1.bf16.msra.mxu0 %v6479
  %6570 = vmatprep.subr.bf16.mxu0 0
  %6571 = vmatpush1.bf16.msra.mxu0 %v6480
  %6572 = vmatprep.subr.bf16.mxu0 0
  %6573 = vmatpush1.bf16.msra.mxu0 %v6481
  %6574 = vmatprep.subr.bf16.mxu0 0
  %6575 = vmatpush1.bf16.msra.mxu0 %v6482
  %6576 = vmatprep.subr.bf16.mxu0 0
  %6577 = vmatpush1.bf16.msra.mxu0 %v6483
  %6578 = vmatprep.subr.bf16.mxu0 0
  %6579 = vmatpush1.bf16.msra.mxu0 %v6484
  %6580 = vmatprep.subr.bf16.mxu0 0
  %6581 = vmatpush1.bf16.msra.mxu0 %v6485
  %6582 = vmatprep.mubr.bf16.mxu0 %v3119
  %6583 = vmatmul.mubr.bf16.gmra.mrb[0].mxu0 %v3116
  %v6584 = vpop.f32.mrb[0].mxu0
  %v6585 = vadd.f32 0.0, %v6584
  %v6586 = vpop.f32.mrb[0].mxu0
  %v6587 = vpop.f32.mrb[0].mxu0
  %v6588 = vadd.f32 0.0, %v6587
  %v6589 = vpop.f32.mrb[0].mxu0
  %6590 = vmatprep.mubr.bf16.mxu0 %v3134
  %6591 = vmatmul.mubr.bf16.gmra.mrb[0].mxu0 %v3131
  %v6592 = vpop.f32.mrb[0].mxu0
  %v6593 = vadd.f32 0.0, %v6592
  %v6594 = vpop.f32.mrb[0].mxu0
  %v6595 = vpop.f32.mrb[0].mxu0
  %v6596 = vadd.f32 0.0, %v6595
  %v6597 = vpop.f32.mrb[0].mxu0
  %6598 = vmatprep.mubr.bf16.mxu0 %v3149
  %6599 = vmatmul.mubr.bf16.gmra.mrb[0].mxu0 %v3146
  %v6600 = vpop.f32.mrb[0].mxu0
  %v6601 = vadd.f32 0.0, %v6600
  %v6602 = vpop.f32.mrb[0].mxu0
  %v6603 = vpop.f32.mrb[0].mxu0
  %v6604 = vadd.f32 0.0, %v6603
  %v6605 = vpop.f32.mrb[0].mxu0
  %6606 = vmatprep.mubr.bf16.mxu0 %v3164
  %6607 = vmatmul.mubr.bf16.gmra.mrb[0].mxu0 %v3161
  %v6608 = vpop.f32.mrb[0].mxu0
  %v6609 = vadd.f32 0.0, %v6608
  %v6610 = vpop.f32.mrb[0].mxu0
  %v6611 = vpop.f32.mrb[0].mxu0
  %v6612 = vadd.f32 0.0, %v6611
  %v6613 = vpop.f32.mrb[0].mxu0
  %6614 = vmatprep.mubr.bf16.mxu0 %v3179
  %6615 = vmatmul.mubr.bf16.gmra.mrb[0].mxu0 %v3176
  %v6616 = vpop.f32.mrb[0].mxu0
  %v6617 = vadd.f32 0.0, %v6616
  %v6618 = vpop.f32.mrb[0].mxu0
  %v6619 = vpop.f32.mrb[0].mxu0
  %v6620 = vadd.f32 0.0, %v6619
  %v6621 = vpop.f32.mrb[0].mxu0
  %6622 = vmatprep.mubr.bf16.mxu0 %v3194
  %6623 = vmatmul.mubr.bf16.gmra.mrb[0].mxu0 %v3191
  %v6624 = vpop.f32.mrb[0].mxu0
  %v6625 = vadd.f32 0.0, %v6624
  %v6626 = vpop.f32.mrb[0].mxu0
  %v6627 = vpop.f32.mrb[0].mxu0
  %v6628 = vadd.f32 0.0, %v6627
  %v6629 = vpop.f32.mrb[0].mxu0
  %6630 = vmatprep.mubr.bf16.mxu0 %v3209
  %6631 = vmatmul.mubr.bf16.gmra.mrb[0].mxu0 %v3206
  %v6632 = vpop.f32.mrb[0].mxu0
  %v6633 = vadd.f32 0.0, %v6632
  %v6634 = vpop.f32.mrb[0].mxu0
  %v6635 = vpop.f32.mrb[0].mxu0
  %v6636 = vadd.f32 0.0, %v6635
  %v6637 = vpop.f32.mrb[0].mxu0
  %6638 = vmatprep.mubr.bf16.mxu0 %v3224
  %6639 = vmatmul.mubr.bf16.gmra.mrb[0].mxu0 %v3221
  %v6640 = vpop.f32.mrb[0].mxu0
  %v6641 = vadd.f32 0.0, %v6640
  %v6642 = vpop.f32.mrb[0].mxu0
  %v6643 = vpop.f32.mrb[0].mxu0
  %v6644 = vadd.f32 0.0, %v6643
  %v6645 = vpop.f32.mrb[0].mxu0
  %6646 = vmatprep.mubr.bf16.mxu0 %v3239
  %6647 = vmatmul.mubr.bf16.gmra.mrb[0].mxu0 %v3236
  %v6648 = vpop.f32.mrb[0].mxu0
  %v6649 = vadd.f32 0.0, %v6648
  %v6650 = vpop.f32.mrb[0].mxu0
  %v6651 = vpop.f32.mrb[0].mxu0
  %v6652 = vadd.f32 0.0, %v6651
  %v6653 = vpop.f32.mrb[0].mxu0
  %6654 = vmatprep.mubr.bf16.mxu0 %v3254
  %6655 = vmatmul.mubr.bf16.gmra.mrb[0].mxu0 %v3251
  %v6656 = vpop.f32.mrb[0].mxu0
  %v6657 = vadd.f32 0.0, %v6656
  %v6658 = vpop.f32.mrb[0].mxu0
  %v6659 = vpop.f32.mrb[0].mxu0
  %v6660 = vadd.f32 0.0, %v6659
  %v6661 = vpop.f32.mrb[0].mxu0
  %6662 = vmatprep.mubr.bf16.mxu0 %v3329
  %6663 = vmatmul.mubr.bf16.gmra.mrb[0].mxu0 %v3326
  %v6664 = vpop.f32.mrb[0].mxu0
  %v6665 = vadd.f32 0.0, %v6664
  %v6666 = vpop.f32.mrb[0].mxu0
  %v6667 = vpop.f32.mrb[0].mxu0
  %v6668 = vadd.f32 0.0, %v6667
  %v6669 = vpop.f32.mrb[0].mxu0
  %6670 = vmatprep.mubr.bf16.mxu0 %v3344
  %6671 = vmatmul.mubr.bf16.gmra.mrb[0].mxu0 %v3341
  %v6672 = vpop.f32.mrb[0].mxu0
  %v6673 = vadd.f32 0.0, %v6672
  %v6674 = vpop.f32.mrb[0].mxu0
  %v6675 = vpop.f32.mrb[0].mxu0
  %v6676 = vadd.f32 0.0, %v6675
  %v6677 = vpop.f32.mrb[0].mxu0
  %6678 = vmatprep.mubr.bf16.mxu0 %v3359
  %6679 = vmatmul.mubr.bf16.gmra.mrb[0].mxu0 %v3356
  %v6680 = vpop.f32.mrb[0].mxu0
  %v6681 = vadd.f32 0.0, %v6680
  %v6682 = vpop.f32.mrb[0].mxu0
  %v6683 = vpop.f32.mrb[0].mxu0
  %v6684 = vadd.f32 0.0, %v6683
  %v6685 = vpop.f32.mrb[0].mxu0
  %6686 = vmatprep.mubr.bf16.mxu0 %v3374
  %6687 = vmatmul.mubr.bf16.gmra.mrb[0].mxu0 %v3371
  %v6688 = vpop.f32.mrb[0].mxu0
  %v6689 = vadd.f32 0.0, %v6688
  %v6690 = vpop.f32.mrb[0].mxu0
  %v6691 = vpop.f32.mrb[0].mxu0
  %v6692 = vadd.f32 0.0, %v6691
  %v6693 = vpop.f32.mrb[0].mxu0
  %6694 = vmatprep.mubr.bf16.mxu0 %v3389
  %6695 = vmatmul.mubr.bf16.gmra.mrb[0].mxu0 %v3386
  %v6696 = vpop.f32.mrb[0].mxu0
  %v6697 = vadd.f32 0.0, %v6696
  %v6698 = vpop.f32.mrb[0].mxu0
  %v6699 = vpop.f32.mrb[0].mxu0
  %v6700 = vadd.f32 0.0, %v6699
  %v6701 = vpop.f32.mrb[0].mxu0
  %6702 = vmatprep.mubr.bf16.mxu0 %v3404
  %6703 = vmatmul.mubr.bf16.gmra.mrb[0].mxu0 %v3401
  %v6704 = vpop.f32.mrb[0].mxu0
  %v6705 = vadd.f32 0.0, %v6704
  %v6706 = vpop.f32.mrb[0].mxu0
  %v6707 = vpop.f32.mrb[0].mxu0
  %v6708 = vadd.f32 0.0, %v6707
  %v6709 = vpop.f32.mrb[0].mxu0
  %6710 = vmatprep.mubr.bf16.mxu0 %v3419
  %6711 = vmatmul.mubr.bf16.gmra.mrb[0].mxu0 %v3416
  %v6712 = vpop.f32.mrb[0].mxu0
  %v6713 = vadd.f32 0.0, %v6712
  %v6714 = vpop.f32.mrb[0].mxu0
  %v6715 = vpop.f32.mrb[0].mxu0
  %v6716 = vadd.f32 0.0, %v6715
  %v6717 = vpop.f32.mrb[0].mxu0
  %6718 = vmatprep.mubr.bf16.mxu0 %v3434
  %6719 = vmatmul.mubr.bf16.gmra.mrb[0].mxu0 %v3431
  %v6720 = vpop.f32.mrb[0].mxu0
  %v6721 = vadd.f32 0.0, %v6720
  %v6722 = vpop.f32.mrb[0].mxu0
  %v6723 = vpop.f32.mrb[0].mxu0
  %v6724 = vadd.f32 0.0, %v6723
  %v6725 = vpop.f32.mrb[0].mxu0
  %6726 = vmatprep.mubr.bf16.mxu0 %v3449
  %6727 = vmatmul.mubr.bf16.gmra.mrb[0].mxu0 %v3446
  %v6728 = vpop.f32.mrb[0].mxu0
  %v6729 = vadd.f32 0.0, %v6728
  %v6730 = vpop.f32.mrb[0].mxu0
  %v6731 = vpop.f32.mrb[0].mxu0
  %v6732 = vadd.f32 0.0, %v6731
  %v6733 = vpop.f32.mrb[0].mxu0
  %6734 = vmatprep.mubr.bf16.mxu0 %v3464
  %6735 = vmatmul.mubr.bf16.gmra.mrb[0].mxu0 %v3461
  %v6736 = vpop.f32.mrb[0].mxu0
  %v6737 = vadd.f32 0.0, %v6736
  %v6738 = vpop.f32.mrb[0].mxu0
  %v6739 = vpop.f32.mrb[0].mxu0
  %v6740 = vadd.f32 0.0, %v6739
  %v6741 = vpop.f32.mrb[0].mxu0
  %6742 = vdwg.mxu0
  %6743 = vmatprep.subr.bf16.mxu0 0
  %6744 = vmatpush1.bf16.msra.mxu0 %v6486
  %6745 = vmatprep.subr.bf16.mxu0 0
  %6746 = vmatpush1.bf16.msra.mxu0 %v6487
  %6747 = vmatprep.subr.bf16.mxu0 0
  %6748 = vmatpush1.bf16.msra.mxu0 %v6488
  %6749 = vmatprep.subr.bf16.mxu0 0
  %6750 = vmatpush1.bf16.msra.mxu0 %v6489
  %6751 = vmatprep.subr.bf16.mxu0 0
  %6752 = vmatpush1.bf16.msra.mxu0 %v6490
  %6753 = vmatprep.subr.bf16.mxu0 0
  %6754 = vmatpush1.bf16.msra.mxu0 %v6491
  %6755 = vmatprep.subr.bf16.mxu0 0
  %6756 = vmatpush1.bf16.msra.mxu0 %v6492
  %6757 = vmatprep.subr.bf16.mxu0 0
  %6758 = vmatpush1.bf16.msra.mxu0 %v6493
  %6759 = vmatprep.subr.bf16.mxu0 0
  %6760 = vmatpush1.bf16.msra.mxu0 %v6494
  %6761 = vmatprep.subr.bf16.mxu0 0
  %6762 = vmatpush1.bf16.msra.mxu0 %v6495
  %6763 = vmatprep.subr.bf16.mxu0 0
  %6764 = vmatpush1.bf16.msra.mxu0 %v6496
  %6765 = vmatprep.subr.bf16.mxu0 0
  %6766 = vmatpush1.bf16.msra.mxu0 %v6497
  %6767 = vmatprep.subr.bf16.mxu0 0
  %6768 = vmatpush1.bf16.msra.mxu0 %v6498
  %6769 = vmatprep.subr.bf16.mxu0 0
  %6770 = vmatpush1.bf16.msra.mxu0 %v6499
  %6771 = vmatprep.subr.bf16.mxu0 0
  %6772 = vmatpush1.bf16.msra.mxu0 %v6500
  %6773 = vmatprep.subr.bf16.mxu0 0
  %6774 = vmatpush1.bf16.msra.mxu0 %v6501
  %6775 = vmatprep.mubr.bf16.mxu0 %v3125
  %6776 = vmatmul.mubr.bf16.gmra.mrb[0].mxu0 %v3122
  %v6777 = vpop.f32.mrb[0].mxu0
  %v6778 = vadd.f32 %v6585, %v6777
  %v6779 = vpop.f32.mrb[0].mxu0
  %v6780 = vpop.f32.mrb[0].mxu0
  %v6781 = vadd.f32 %v6588, %v6780
  %v6782 = vpop.f32.mrb[0].mxu0
  %6783 = vmatprep.mubr.bf16.mxu0 %v3140
  %6784 = vmatmul.mubr.bf16.gmra.mrb[0].mxu0 %v3137
  %v6785 = vpop.f32.mrb[0].mxu0
  %v6786 = vadd.f32 %v6593, %v6785
  %v6787 = vpop.f32.mrb[0].mxu0
  %v6788 = vpop.f32.mrb[0].mxu0
  %v6789 = vadd.f32 %v6596, %v6788
  %v6790 = vpop.f32.mrb[0].mxu0
  %6791 = vmatprep.mubr.bf16.mxu0 %v3155
  %6792 = vmatmul.mubr.bf16.gmra.mrb[0].mxu0 %v3152
  %v6793 = vpop.f32.mrb[0].mxu0
  %v6794 = vadd.f32 %v6601, %v6793
  %v6795 = vpop.f32.mrb[0].mxu0
  %v6796 = vpop.f32.mrb[0].mxu0
  %v6797 = vadd.f32 %v6604, %v6796
  %v6798 = vpop.f32.mrb[0].mxu0
  %6799 = vmatprep.mubr.bf16.mxu0 %v3170
  %6800 = vmatmul.mubr.bf16.gmra.mrb[0].mxu0 %v3167
  %v6801 = vpop.f32.mrb[0].mxu0
  %v6802 = vadd.f32 %v6609, %v6801
  %v6803 = vpop.f32.mrb[0].mxu0
  %v6804 = vpop.f32.mrb[0].mxu0
  %v6805 = vadd.f32 %v6612, %v6804
  %v6806 = vpop.f32.mrb[0].mxu0
  %6807 = vmatprep.mubr.bf16.mxu0 %v3185
  %6808 = vmatmul.mubr.bf16.gmra.mrb[0].mxu0 %v3182
  %v6809 = vpop.f32.mrb[0].mxu0
  %v6810 = vadd.f32 %v6617, %v6809
  %v6811 = vpop.f32.mrb[0].mxu0
  %v6812 = vpop.f32.mrb[0].mxu0
  %v6813 = vadd.f32 %v6620, %v6812
  %v6814 = vpop.f32.mrb[0].mxu0
  %6815 = vmatprep.mubr.bf16.mxu0 %v3200
  %6816 = vmatmul.mubr.bf16.gmra.mrb[0].mxu0 %v3197
  %v6817 = vpop.f32.mrb[0].mxu0
  %v6818 = vadd.f32 %v6625, %v6817
  %v6819 = vpop.f32.mrb[0].mxu0
  %v6820 = vpop.f32.mrb[0].mxu0
  %v6821 = vadd.f32 %v6628, %v6820
  %v6822 = vpop.f32.mrb[0].mxu0
  %6823 = vmatprep.mubr.bf16.mxu0 %v3215
  %6824 = vmatmul.mubr.bf16.gmra.mrb[0].mxu0 %v3212
  %v6825 = vpop.f32.mrb[0].mxu0
  %v6826 = vadd.f32 %v6633, %v6825
  %v6827 = vpop.f32.mrb[0].mxu0
  %v6828 = vpop.f32.mrb[0].mxu0
  %v6829 = vadd.f32 %v6636, %v6828
  %v6830 = vpop.f32.mrb[0].mxu0
  %6831 = vmatprep.mubr.bf16.mxu0 %v3230
  %6832 = vmatmul.mubr.bf16.gmra.mrb[0].mxu0 %v3227
  %v6833 = vpop.f32.mrb[0].mxu0
  %v6834 = vadd.f32 %v6641, %v6833
  %v6835 = vpop.f32.mrb[0].mxu0
  %v6836 = vpop.f32.mrb[0].mxu0
  %v6837 = vadd.f32 %v6644, %v6836
  %v6838 = vpop.f32.mrb[0].mxu0
  %6839 = vmatprep.mubr.bf16.mxu0 %v3245
  %6840 = vmatmul.mubr.bf16.gmra.mrb[0].mxu0 %v3242
  %v6841 = vpop.f32.mrb[0].mxu0
  %v6842 = vadd.f32 %v6649, %v6841
  %v6843 = vpop.f32.mrb[0].mxu0
  %v6844 = vpop.f32.mrb[0].mxu0
  %v6845 = vadd.f32 %v6652, %v6844
  %v6846 = vpop.f32.mrb[0].mxu0
  %6847 = vmatprep.mubr.bf16.mxu0 %v3260
  %6848 = vmatmul.mubr.bf16.gmra.mrb[0].mxu0 %v3257
  %v6849 = vpop.f32.mrb[0].mxu0
  %v6850 = vadd.f32 %v6657, %v6849
  %v6851 = vpop.f32.mrb[0].mxu0
  %v6852 = vpop.f32.mrb[0].mxu0
  %v6853 = vadd.f32 %v6660, %v6852
  %v6854 = vpop.f32.mrb[0].mxu0
  %6855 = vmatprep.mubr.bf16.mxu0 %v3335
  %6856 = vmatmul.mubr.bf16.gmra.mrb[0].mxu0 %v3332
  %v6857 = vpop.f32.mrb[0].mxu0
  %v6858 = vadd.f32 %v6665, %v6857
  %v6859 = vpop.f32.mrb[0].mxu0
  %v6860 = vpop.f32.mrb[0].mxu0
  %v6861 = vadd.f32 %v6668, %v6860
  %v6862 = vpop.f32.mrb[0].mxu0
  %6863 = vmatprep.mubr.bf16.mxu0 %v3350
  %6864 = vmatmul.mubr.bf16.gmra.mrb[0].mxu0 %v3347
  %v6865 = vpop.f32.mrb[0].mxu0
  %v6866 = vadd.f32 %v6673, %v6865
  %v6867 = vpop.f32.mrb[0].mxu0
  %v6868 = vpop.f32.mrb[0].mxu0
  %v6869 = vadd.f32 %v6676, %v6868
  %v6870 = vpop.f32.mrb[0].mxu0
  %6871 = vmatprep.mubr.bf16.mxu0 %v3365
  %6872 = vmatmul.mubr.bf16.gmra.mrb[0].mxu0 %v3362
  %v6873 = vpop.f32.mrb[0].mxu0
  %v6874 = vadd.f32 %v6681, %v6873
  %v6875 = vpop.f32.mrb[0].mxu0
  %v6876 = vpop.f32.mrb[0].mxu0
  %v6877 = vadd.f32 %v6684, %v6876
  %v6878 = vpop.f32.mrb[0].mxu0
  %6879 = vmatprep.mubr.bf16.mxu0 %v3380
  %6880 = vmatmul.mubr.bf16.gmra.mrb[0].mxu0 %v3377
  %v6881 = vpop.f32.mrb[0].mxu0
  %v6882 = vadd.f32 %v6689, %v6881
  %v6883 = vpop.f32.mrb[0].mxu0
  %v6884 = vpop.f32.mrb[0].mxu0
  %v6885 = vadd.f32 %v6692, %v6884
  %v6886 = vpop.f32.mrb[0].mxu0
  %6887 = vmatprep.mubr.bf16.mxu0 %v3395
  %6888 = vmatmul.mubr.bf16.gmra.mrb[0].mxu0 %v3392
  %v6889 = vpop.f32.mrb[0].mxu0
  %v6890 = vadd.f32 %v6697, %v6889
  %v6891 = vpop.f32.mrb[0].mxu0
  %v6892 = vpop.f32.mrb[0].mxu0
  %v6893 = vadd.f32 %v6700, %v6892
  %v6894 = vpop.f32.mrb[0].mxu0
  %6895 = vmatprep.mubr.bf16.mxu0 %v3410
  %6896 = vmatmul.mubr.bf16.gmra.mrb[0].mxu0 %v3407
  %v6897 = vpop.f32.mrb[0].mxu0
  %v6898 = vadd.f32 %v6705, %v6897
  %v6899 = vpop.f32.mrb[0].mxu0
  %v6900 = vpop.f32.mrb[0].mxu0
  %v6901 = vadd.f32 %v6708, %v6900
  %v6902 = vpop.f32.mrb[0].mxu0
  %6903 = vmatprep.mubr.bf16.mxu0 %v3425
  %6904 = vmatmul.mubr.bf16.gmra.mrb[0].mxu0 %v3422
  %v6905 = vpop.f32.mrb[0].mxu0
  %v6906 = vadd.f32 %v6713, %v6905
  %v6907 = vpop.f32.mrb[0].mxu0
  %v6908 = vpop.f32.mrb[0].mxu0
  %v6909 = vadd.f32 %v6716, %v6908
  %v6910 = vpop.f32.mrb[0].mxu0
  %6911 = vmatprep.mubr.bf16.mxu0 %v3440
  %6912 = vmatmul.mubr.bf16.gmra.mrb[0].mxu0 %v3437
  %v6913 = vpop.f32.mrb[0].mxu0
  %v6914 = vadd.f32 %v6721, %v6913
  %v6915 = vpop.f32.mrb[0].mxu0
  %v6916 = vpop.f32.mrb[0].mxu0
  %v6917 = vadd.f32 %v6724, %v6916
  %v6918 = vpop.f32.mrb[0].mxu0
  %6919 = vmatprep.mubr.bf16.mxu0 %v3455
  %6920 = vmatmul.mubr.bf16.gmra.mrb[0].mxu0 %v3452
  %v6921 = vpop.f32.mrb[0].mxu0
  %v6922 = vadd.f32 %v6729, %v6921
  %v6923 = vpop.f32.mrb[0].mxu0
  %v6924 = vpop.f32.mrb[0].mxu0
  %v6925 = vadd.f32 %v6732, %v6924
  %v6926 = vpop.f32.mrb[0].mxu0
  %6927 = vmatprep.mubr.bf16.mxu0 %v3470
  %6928 = vmatmul.mubr.bf16.gmra.mrb[0].mxu0 %v3467
  %v6929 = vpop.f32.mrb[0].mxu0
  %v6930 = vadd.f32 %v6737, %v6929
  %v6931 = vpop.f32.mrb[0].mxu0
  %v6932 = vpop.f32.mrb[0].mxu0
  %v6933 = vadd.f32 %v6740, %v6932
  %v6934 = vpop.f32.mrb[0].mxu0
  %6935 = vdwg.mxu0
  %6936 = vmatprep.subr.bf16.mxu0 0
  %6937 = vmatpush1.bf16.msra.mxu0 %v6502
  %6938 = vmatprep.subr.bf16.mxu0 0
  %6939 = vmatpush1.bf16.msra.mxu0 %v6503
  %6940 = vmatprep.subr.bf16.mxu0 0
  %6941 = vmatpush1.bf16.msra.mxu0 %v6504
  %6942 = vmatprep.subr.bf16.mxu0 0
  %6943 = vmatpush1.bf16.msra.mxu0 %v6505
  %6944 = vmatprep.subr.bf16.mxu0 0
  %6945 = vmatpush1.bf16.msra.mxu0 %v6506
  %6946 = vmatprep.subr.bf16.mxu0 0
  %6947 = vmatpush1.bf16.msra.mxu0 %v6507
  %6948 = vmatprep.subr.bf16.mxu0 0
  %6949 = vmatpush1.bf16.msra.mxu0 %v6508
  %6950 = vmatprep.subr.bf16.mxu0 0
  %6951 = vmatpush1.bf16.msra.mxu0 %v6509
  %6952 = vmatprep.subr.bf16.mxu0 0
  %6953 = vmatpush1.bf16.msra.mxu0 0
  %6954 = vmatprep.subr.bf16.mxu0 0
  %6955 = vmatpush1.bf16.msra.mxu0 0
  %6956 = vmatprep.subr.bf16.mxu0 0
  %6957 = vmatpush1.bf16.msra.mxu0 0
  %6958 = vmatprep.subr.bf16.mxu0 0
  %6959 = vmatpush1.bf16.msra.mxu0 0
  %6960 = vmatprep.subr.bf16.mxu0 0
  %6961 = vmatpush1.bf16.msra.mxu0 0
  %6962 = vmatprep.subr.bf16.mxu0 0
  %6963 = vmatpush1.bf16.msra.mxu0 0
  %6964 = vmatprep.subr.bf16.mxu0 0
  %6965 = vmatpush1.bf16.msra.mxu0 0
  %6966 = vmatprep.subr.bf16.mxu0 0
  %6967 = vmatpush1.bf16.msra.mxu0 0
  %6968 = vmatprep.mubr.bf16.mxu0 0
  %6969 = vmatmul.mubr.bf16.gmra.mrb[0].mxu0 %v3128
  %v6970 = vpop.f32.mrb[0].mxu0
  %v6971 = vadd.f32 %v6778, %v6970
  %v6972 = vpop.f32.mrb[0].mxu0
  %v6973 = vpop.f32.mrb[0].mxu0
  %v6974 = vadd.f32 %v6781, %v6973
  %v6975 = vpop.f32.mrb[0].mxu0
  %6976 = vmatprep.mubr.bf16.mxu0 0
  %6977 = vmatmul.mubr.bf16.gmra.mrb[0].mxu0 %v3143
  %v6978 = vpop.f32.mrb[0].mxu0
  %v6979 = vadd.f32 %v6786, %v6978
  %v6980 = vpop.f32.mrb[0].mxu0
  %v6981 = vpop.f32.mrb[0].mxu0
  %v6982 = vadd.f32 %v6789, %v6981
  %v6983 = vpop.f32.mrb[0].mxu0
  %6984 = vmatprep.mubr.bf16.mxu0 0
  %6985 = vmatmul.mubr.bf16.gmra.mrb[0].mxu0 %v3158
  %v6986 = vpop.f32.mrb[0].mxu0
  %v6987 = vadd.f32 %v6794, %v6986
  %v6988 = vpop.f32.mrb[0].mxu0
  %v6989 = vpop.f32.mrb[0].mxu0
  %v6990 = vadd.f32 %v6797, %v6989
  %v6991 = vpop.f32.mrb[0].mxu0
  %6992 = vmatprep.mubr.bf16.mxu0 0
  %6993 = vmatmul.mubr.bf16.gmra.mrb[0].mxu0 %v3173
  %v6994 = vpop.f32.mrb[0].mxu0
  %v6995 = vadd.f32 %v6802, %v6994
  %v6996 = vpop.f32.mrb[0].mxu0
  %v6997 = vpop.f32.mrb[0].mxu0
  %v6998 = vadd.f32 %v6805, %v6997
  %v6999 = vpop.f32.mrb[0].mxu0
  %7000 = vmatprep.mubr.bf16.mxu0 0
  %7001 = vmatmul.mubr.bf16.gmra.mrb[0].mxu0 %v3188
  %v7002 = vpop.f32.mrb[0].mxu0
  %v7003 = vadd.f32 %v6810, %v7002
  %v7004 = vpop.f32.mrb[0].mxu0
  %v7005 = vpop.f32.mrb[0].mxu0
  %v7006 = vadd.f32 %v6813, %v7005
  %v7007 = vpop.f32.mrb[0].mxu0
  %7008 = vmatprep.mubr.bf16.mxu0 0
  %7009 = vmatmul.mubr.bf16.gmra.mrb[0].mxu0 %v3203
  %v7010 = vpop.f32.mrb[0].mxu0
  %v7011 = vadd.f32 %v6818, %v7010
  %v7012 = vpop.f32.mrb[0].mxu0
  %v7013 = vpop.f32.mrb[0].mxu0
  %v7014 = vadd.f32 %v6821, %v7013
  %v7015 = vpop.f32.mrb[0].mxu0
  %7016 = vmatprep.mubr.bf16.mxu0 0
  %7017 = vmatmul.mubr.bf16.gmra.mrb[0].mxu0 %v3218
  %v7018 = vpop.f32.mrb[0].mxu0
  %v7019 = vadd.f32 %v6826, %v7018
  %v7020 = vpop.f32.mrb[0].mxu0
  %v7021 = vpop.f32.mrb[0].mxu0
  %v7022 = vadd.f32 %v6829, %v7021
  %v7023 = vpop.f32.mrb[0].mxu0
  %7024 = vmatprep.mubr.bf16.mxu0 0
  %7025 = vmatmul.mubr.bf16.gmra.mrb[0].mxu0 %v3233
  %v7026 = vpop.f32.mrb[0].mxu0
  %v7027 = vadd.f32 %v6834, %v7026
  %v7028 = vpop.f32.mrb[0].mxu0
  %v7029 = vpop.f32.mrb[0].mxu0
  %v7030 = vadd.f32 %v6837, %v7029
  %v7031 = vpop.f32.mrb[0].mxu0
  %7032 = vmatprep.mubr.bf16.mxu0 0
  %7033 = vmatmul.mubr.bf16.gmra.mrb[0].mxu0 %v3248
  %v7034 = vpop.f32.mrb[0].mxu0
  %v7035 = vadd.f32 %v6842, %v7034
  %v7036 = vpop.f32.mrb[0].mxu0
  %v7037 = vpop.f32.mrb[0].mxu0
  %v7038 = vadd.f32 %v6845, %v7037
  %v7039 = vpop.f32.mrb[0].mxu0
  %7040 = vmatprep.mubr.bf16.mxu0 0
  %7041 = vmatmul.mubr.bf16.gmra.mrb[0].mxu0 %v3263
  %v7042 = vpop.f32.mrb[0].mxu0
  %v7043 = vadd.f32 %v6850, %v7042
  %v7044 = vpop.f32.mrb[0].mxu0
  %v7045 = vpop.f32.mrb[0].mxu0
  %v7046 = vadd.f32 %v6853, %v7045
  %v7047 = vpop.f32.mrb[0].mxu0
  %7048 = vmatprep.mubr.bf16.mxu0 0
  %7049 = vmatmul.mubr.bf16.gmra.mrb[0].mxu0 %v3338
  %v7050 = vpop.f32.mrb[0].mxu0
  %v7051 = vadd.f32 %v6858, %v7050
  %v7052 = vpop.f32.mrb[0].mxu0
  %v7053 = vpop.f32.mrb[0].mxu0
  %v7054 = vadd.f32 %v6861, %v7053
  %v7055 = vpop.f32.mrb[0].mxu0
  %7056 = vmatprep.mubr.bf16.mxu0 0
  %7057 = vmatmul.mubr.bf16.gmra.mrb[0].mxu0 %v3353
  %v7058 = vpop.f32.mrb[0].mxu0
  %v7059 = vadd.f32 %v6866, %v7058
  %v7060 = vpop.f32.mrb[0].mxu0
  %v7061 = vpop.f32.mrb[0].mxu0
  %v7062 = vadd.f32 %v6869, %v7061
  %v7063 = vpop.f32.mrb[0].mxu0
  %7064 = vmatprep.mubr.bf16.mxu0 0
  %7065 = vmatmul.mubr.bf16.gmra.mrb[0].mxu0 %v3368
  %v7066 = vpop.f32.mrb[0].mxu0
  %v7067 = vadd.f32 %v6874, %v7066
  %v7068 = vpop.f32.mrb[0].mxu0
  %v7069 = vpop.f32.mrb[0].mxu0
  %v7070 = vadd.f32 %v6877, %v7069
  %v7071 = vpop.f32.mrb[0].mxu0
  %7072 = vmatprep.mubr.bf16.mxu0 0
  %7073 = vmatmul.mubr.bf16.gmra.mrb[0].mxu0 %v3383
  %v7074 = vpop.f32.mrb[0].mxu0
  %v7075 = vadd.f32 %v6882, %v7074
  %v7076 = vpop.f32.mrb[0].mxu0
  %v7077 = vpop.f32.mrb[0].mxu0
  %v7078 = vadd.f32 %v6885, %v7077
  %v7079 = vpop.f32.mrb[0].mxu0
  %7080 = vmatprep.mubr.bf16.mxu0 0
  %7081 = vmatmul.mubr.bf16.gmra.mrb[0].mxu0 %v3398
  %v7082 = vpop.f32.mrb[0].mxu0
  %v7083 = vadd.f32 %v6890, %v7082
  %v7084 = vpop.f32.mrb[0].mxu0
  %v7085 = vpop.f32.mrb[0].mxu0
  %v7086 = vadd.f32 %v6893, %v7085
  %v7087 = vpop.f32.mrb[0].mxu0
  %7088 = vmatprep.mubr.bf16.mxu0 0
  %7089 = vmatmul.mubr.bf16.gmra.mrb[0].mxu0 %v3413
  %v7090 = vpop.f32.mrb[0].mxu0
  %v7091 = vadd.f32 %v6898, %v7090
  %v7092 = vpop.f32.mrb[0].mxu0
  %v7093 = vpop.f32.mrb[0].mxu0
  %v7094 = vadd.f32 %v6901, %v7093
  %v7095 = vpop.f32.mrb[0].mxu0
  %7096 = vmatprep.mubr.bf16.mxu0 0
  %7097 = vmatmul.mubr.bf16.gmra.mrb[0].mxu0 %v3428
  %v7098 = vpop.f32.mrb[0].mxu0
  %v7099 = vadd.f32 %v6906, %v7098
  %v7100 = vpop.f32.mrb[0].mxu0
  %v7101 = vpop.f32.mrb[0].mxu0
  %v7102 = vadd.f32 %v6909, %v7101
  %v7103 = vpop.f32.mrb[0].mxu0
  %7104 = vmatprep.mubr.bf16.mxu0 0
  %7105 = vmatmul.mubr.bf16.gmra.mrb[0].mxu0 %v3443
  %v7106 = vpop.f32.mrb[0].mxu0
  %v7107 = vadd.f32 %v6914, %v7106
  %v7108 = vpop.f32.mrb[0].mxu0
  %v7109 = vpop.f32.mrb[0].mxu0
  %v7110 = vadd.f32 %v6917, %v7109
  %v7111 = vpop.f32.mrb[0].mxu0
  %7112 = vmatprep.mubr.bf16.mxu0 0
  %7113 = vmatmul.mubr.bf16.gmra.mrb[0].mxu0 %v3458
  %v7114 = vpop.f32.mrb[0].mxu0
  %v7115 = vadd.f32 %v6922, %v7114
  %v7116 = vpop.f32.mrb[0].mxu0
  %v7117 = vpop.f32.mrb[0].mxu0
  %v7118 = vadd.f32 %v6925, %v7117
  %v7119 = vpop.f32.mrb[0].mxu0
  %7120 = vmatprep.mubr.bf16.mxu0 0
  %7121 = vmatmul.mubr.bf16.gmra.mrb[0].mxu0 %v3473
  %v7122 = vpop.f32.mrb[0].mxu0
  %v7123 = vadd.f32 %v6930, %v7122
  %v7124 = vpop.f32.mrb[0].mxu0
  %v7125 = vpop.f32.mrb[0].mxu0
  %v7126 = vadd.f32 %v6933, %v7125
  %v7127 = vpop.f32.mrb[0].mxu0
  %7128 = vdwg.mxu0
  %v7129 = vadd.f32 %v6189, %v6971
  %v7130 = vadd.f32 %v6190, %v6974
  %v7131 = vadd.f32 %v6191, %v6979
  %v7132 = vadd.f32 %v6192, %v6982
  %v7133 = vadd.f32 %v6193, %v6987
  %v7134 = vadd.f32 %v6194, %v6990
  %v7135 = vadd.f32 %v6195, %v6995
  %v7136 = vadd.f32 %v6196, %v6998
  %v7137 = vadd.f32 %v6197, %v7003
  %v7138 = vadd.f32 %v6198, %v7006
  %v7139 = vadd.f32 %v6199, %v7011
  %v7140 = vadd.f32 %v6200, %v7014
  %v7141 = vadd.f32 %v6201, %v7019
  %v7142 = vadd.f32 %v6202, %v7022
  %v7143 = vadd.f32 %v6203, %v7027
  %v7144 = vadd.f32 %v6204, %v7030
  %v7145 = vadd.f32 %v6205, %v7035
  %v7146 = vadd.f32 %v6206, %v7038
  %v7147 = vadd.f32 %v6207, %v7043
  %v7148 = vadd.f32 %v6208, %v7046
  %v7149 = vadd.f32 %v6209, %v7051
  %v7150 = vadd.f32 %v6210, %v7054
  %v7151 = vadd.f32 %v6211, %v7059
  %v7152 = vadd.f32 %v6212, %v7062
  %v7153 = vadd.f32 %v6213, %v7067
  %v7154 = vadd.f32 %v6214, %v7070
  %v7155 = vadd.f32 %v6215, %v7075
  %v7156 = vadd.f32 %v6216, %v7078
  %v7157 = vadd.f32 %v6217, %v7083
  %v7158 = vadd.f32 %v6218, %v7086
  %v7159 = vadd.f32 %v6219, %v7091
  %v7160 = vadd.f32 %v6220, %v7094
  %v7161 = vadd.f32 %v6221, %v7099
  %v7162 = vadd.f32 %v6222, %v7102
  %v7163 = vadd.f32 %v6223, %v7107
  %v7164 = vadd.f32 %v6224, %v7110
  %v7165 = vadd.f32 %v6225, %v7115
  %v7166 = vadd.f32 %v6226, %v7118
  %v7167 = vadd.f32 %v6227, %v7123
  %v7168 = vadd.f32 %v6228, %v7126
  %s7169 = scalar_lea.vmem %s3, 1280
  %v7170 = vld [vmem:[%s7169] sm:$0xf]
  %v7171 = vld [vmem:[%s7169 + $0x4] sm:$0xf]
  %v7172 = vld [vmem:[%s7169 + $0x8] sm:$0xf]
  %v7173 = vld [vmem:[%s7169 + $0xc] sm:$0xf]
  %v7174 = vld [vmem:[%s7169 + $0x10] sm:$0xf]
  %v7175 = vld [vmem:[%s7169 + $0x14] sm:$0xf]
  %v7176 = vld [vmem:[%s7169 + $0x18] sm:$0xf]
  %v7177 = vld [vmem:[%s7169 + $0x1c] sm:$0xf]
  %v7178 = vld [vmem:[%s7169 + $0x20] sm:$0xf]
  %v7179 = vld [vmem:[%s7169 + $0x24] sm:$0xf]
  %v7180 = vld [vmem:[%s7169 + $0x28] sm:$0xf]
  %v7181 = vld [vmem:[%s7169 + $0x2c] sm:$0xf]
  %v7182 = vld [vmem:[%s7169 + $0x30] sm:$0xf]
  %v7183 = vld [vmem:[%s7169 + $0x34] sm:$0xf]
  %v7184 = vld [vmem:[%s7169 + $0x38] sm:$0xf]
  %v7185 = vld [vmem:[%s7169 + $0x3c] sm:$0xf]
  %v7186 = vld [vmem:[%s7169 + $0x40] sm:$0xf]
  %v7187 = vld [vmem:[%s7169 + $0x44] sm:$0xf]
  %v7188 = vld [vmem:[%s7169 + $0x48] sm:$0xf]
  %v7189 = vld [vmem:[%s7169 + $0x4c] sm:$0xf]
  %v7190 = vld [vmem:[%s7169 + $0x50] sm:$0xf]
  %v7191 = vld [vmem:[%s7169 + $0x54] sm:$0xf]
  %v7192 = vld [vmem:[%s7169 + $0x58] sm:$0xf]
  %v7193 = vld [vmem:[%s7169 + $0x5c] sm:$0xf]
  %v7194 = vld [vmem:[%s7169 + $0x60] sm:$0xf]
  %v7195 = vld [vmem:[%s7169 + $0x64] sm:$0xf]
  %v7196 = vld [vmem:[%s7169 + $0x68] sm:$0xf]
  %v7197 = vld [vmem:[%s7169 + $0x6c] sm:$0xf]
  %v7198 = vld [vmem:[%s7169 + $0x70] sm:$0xf]
  %v7199 = vld [vmem:[%s7169 + $0x74] sm:$0xf]
  %v7200 = vld [vmem:[%s7169 + $0x78] sm:$0xf]
  %v7201 = vld [vmem:[%s7169 + $0x7c] sm:$0xf]
  %v7202 = vld [vmem:[%s7169 + $0x80] sm:$0xf]
  %v7203 = vld [vmem:[%s7169 + $0x84] sm:$0xf]
  %v7204 = vld [vmem:[%s7169 + $0x88] sm:$0xf]
  %v7205 = vld [vmem:[%s7169 + $0x8c] sm:$0xf]
  %v7206 = vld [vmem:[%s7169 + $0x90] sm:$0xf]
  %v7207 = vld [vmem:[%s7169 + $0x94] sm:$0xf]
  %v7208 = vld [vmem:[%s7169 + $0x98] sm:$0xf]
  %v7209 = vld [vmem:[%s7169 + $0x9c] sm:$0xf]
  %v7210 = vld [vmem:[%s7169 + $0xa0] sm:$0xf]
  %v7211 = vld [vmem:[%s7169 + $0xa4] sm:$0xf]
  %v7212 = vld [vmem:[%s7169 + $0xa8] sm:$0xf]
  %v7213 = vld [vmem:[%s7169 + $0xac] sm:$0xf]
  %v7214 = vld [vmem:[%s7169 + $0xb0] sm:$0xf]
  %v7215 = vld [vmem:[%s7169 + $0xb4] sm:$0xf]
  %v7216 = vld [vmem:[%s7169 + $0xb8] sm:$0xf]
  %v7217 = vld [vmem:[%s7169 + $0xbc] sm:$0xf]
  %v7218 = vld [vmem:[%s7169 + $0xc0] sm:$0xf]
  %v7219 = vld [vmem:[%s7169 + $0xc4] sm:$0xf]
  %v7220 = vld [vmem:[%s7169 + $0xc8] sm:$0xf]
  %v7221 = vld [vmem:[%s7169 + $0xcc] sm:$0xf]
  %v7222 = vld [vmem:[%s7169 + $0xd0] sm:$0xf]
  %v7223 = vld [vmem:[%s7169 + $0xd4] sm:$0xf]
  %v7224 = vld [vmem:[%s7169 + $0xd8] sm:$0xf]
  %v7225 = vld [vmem:[%s7169 + $0xdc] sm:$0xf]
  %v7226 = vld [vmem:[%s7169 + $0xe0] sm:$0xf]
  %v7227 = vld [vmem:[%s7169 + $0xe4] sm:$0xf]
  %v7228 = vld [vmem:[%s7169 + $0xe8] sm:$0xf]
  %v7229 = vld [vmem:[%s7169 + $0xec] sm:$0xf]
  %v7230 = vld [vmem:[%s7169 + $0xf0] sm:$0xf]
  %v7231 = vld [vmem:[%s7169 + $0xf4] sm:$0xf]
  %v7232 = vld [vmem:[%s7169 + $0xf8] sm:$0xf]
  %v7233 = vld [vmem:[%s7169 + $0xfc] sm:$0xf]
  %v7234 = vld [vmem:[%s7169 + $0x100] sm:$0xf]
  %v7235 = vld [vmem:[%s7169 + $0x104] sm:$0xf]
  %v7236 = vld [vmem:[%s7169 + $0x108] sm:$0xf]
  %v7237 = vld [vmem:[%s7169 + $0x10c] sm:$0xf]
  %v7238 = vld [vmem:[%s7169 + $0x110] sm:$0xf]
  %v7239 = vld [vmem:[%s7169 + $0x114] sm:$0xf]
  %v7240 = vld [vmem:[%s7169 + $0x118] sm:$0xf]
  %v7241 = vld [vmem:[%s7169 + $0x11c] sm:$0xf]
  %v7242 = vld [vmem:[%s7169 + $0x120] sm:$0xf]
  %v7243 = vld [vmem:[%s7169 + $0x124] sm:$0xf]
  %v7244 = vld [vmem:[%s7169 + $0x128] sm:$0xf]
  %v7245 = vld [vmem:[%s7169 + $0x12c] sm:$0xf]
  %v7246 = vld [vmem:[%s7169 + $0x130] sm:$0xf]
  %v7247 = vld [vmem:[%s7169 + $0x134] sm:$0xf]
  %v7248 = vld [vmem:[%s7169 + $0x138] sm:$0xf]
  %v7249 = vld [vmem:[%s7169 + $0x13c] sm:$0xf]
  %v7330 = vunpack.c.l.b16 %v7170
  %v7331 = vunpack.c.l.b16 %v7171
  %v7332 = vunpack.c.l.b16 %v7172
  %v7333 = vunpack.c.l.b16 %v7173
  %v7334 = vunpack.c.l.b16 %v7174
  %v7335 = vunpack.c.l.b16 %v7175
  %v7336 = vunpack.c.l.b16 %v7176
  %v7337 = vunpack.c.l.b16 %v7177
  %v7338 = vunpack.c.l.b16 %v7178
  %v7339 = vunpack.c.l.b16 %v7179
  %v7340 = vunpack.c.l.b16 %v7180
  %v7341 = vunpack.c.l.b16 %v7181
  %v7342 = vunpack.c.l.b16 %v7182
  %v7343 = vunpack.c.l.b16 %v7183
  %v7344 = vunpack.c.l.b16 %v7184
  %v7345 = vunpack.c.l.b16 %v7185
  %v7346 = vunpack.c.l.b16 %v7186
  %v7347 = vunpack.c.l.b16 %v7187
  %v7348 = vunpack.c.l.b16 %v7188
  %v7349 = vunpack.c.l.b16 %v7189
  %v7350 = vunpack.c.l.b16 %v7190
  %v7351 = vunpack.c.l.b16 %v7191
  %v7352 = vunpack.c.l.b16 %v7192
  %v7353 = vunpack.c.l.b16 %v7193
  %v7354 = vunpack.c.l.b16 %v7194
  %v7355 = vunpack.c.l.b16 %v7195
  %v7356 = vunpack.c.l.b16 %v7196
  %v7357 = vunpack.c.l.b16 %v7197
  %v7358 = vunpack.c.l.b16 %v7198
  %v7359 = vunpack.c.l.b16 %v7199
  %v7360 = vunpack.c.l.b16 %v7200
  %v7361 = vunpack.c.l.b16 %v7201
  %v7362 = vunpack.c.l.b16 %v7202
  %v7363 = vunpack.c.l.b16 %v7203
  %v7364 = vunpack.c.l.b16 %v7204
  %v7365 = vunpack.c.l.b16 %v7205
  %v7366 = vunpack.c.l.b16 %v7206
  %v7367 = vunpack.c.l.b16 %v7207
  %v7368 = vunpack.c.l.b16 %v7208
  %v7369 = vunpack.c.l.b16 %v7209
  %v7370 = vunpack.c.l.b16 %v7210
  %v7371 = vunpack.c.l.b16 %v7211
  %v7372 = vunpack.c.l.b16 %v7212
  %v7373 = vunpack.c.l.b16 %v7213
  %v7374 = vunpack.c.l.b16 %v7214
  %v7375 = vunpack.c.l.b16 %v7215
  %v7376 = vunpack.c.l.b16 %v7216
  %v7377 = vunpack.c.l.b16 %v7217
  %v7378 = vunpack.c.l.b16 %v7218
  %v7379 = vunpack.c.l.b16 %v7219
  %v7380 = vunpack.c.l.b16 %v7220
  %v7381 = vunpack.c.l.b16 %v7221
  %v7382 = vunpack.c.l.b16 %v7222
  %v7383 = vunpack.c.l.b16 %v7223
  %v7384 = vunpack.c.l.b16 %v7224
  %v7385 = vunpack.c.l.b16 %v7225
  %v7386 = vunpack.c.l.b16 %v7226
  %v7387 = vunpack.c.l.b16 %v7227
  %v7388 = vunpack.c.l.b16 %v7228
  %v7389 = vunpack.c.l.b16 %v7229
  %v7390 = vunpack.c.l.b16 %v7230
  %v7391 = vunpack.c.l.b16 %v7231
  %v7392 = vunpack.c.l.b16 %v7232
  %v7393 = vunpack.c.l.b16 %v7233
  %v7394 = vunpack.c.l.b16 %v7234
  %v7395 = vunpack.c.l.b16 %v7235
  %v7396 = vunpack.c.l.b16 %v7236
  %v7397 = vunpack.c.l.b16 %v7237
  %v7398 = vunpack.c.l.b16 %v7238
  %v7399 = vunpack.c.l.b16 %v7239
  %v7400 = vunpack.c.l.b16 %v7240
  %v7401 = vunpack.c.l.b16 %v7241
  %v7402 = vunpack.c.l.b16 %v7242
  %v7403 = vunpack.c.l.b16 %v7243
  %v7404 = vunpack.c.l.b16 %v7244
  %v7405 = vunpack.c.l.b16 %v7245
  %v7406 = vunpack.c.l.b16 %v7246
  %v7407 = vunpack.c.l.b16 %v7247
  %v7408 = vunpack.c.l.b16 %v7248
  %v7409 = vunpack.c.l.b16 %v7249
  %v7410 = vpack.c.b16 %v7331, %v7330
  %v7411 = vpack.c.b16 %v7333, %v7332
  %v7412 = vpack.c.b16 %v7335, %v7334
  %v7413 = vpack.c.b16 %v7337, %v7336
  %v7414 = vpack.c.b16 %v7339, %v7338
  %v7415 = vpack.c.b16 %v7341, %v7340
  %v7416 = vpack.c.b16 %v7343, %v7342
  %v7417 = vpack.c.b16 %v7345, %v7344
  %v7418 = vpack.c.b16 %v7347, %v7346
  %v7419 = vpack.c.b16 %v7349, %v7348
  %v7420 = vpack.c.b16 %v7351, %v7350
  %v7421 = vpack.c.b16 %v7353, %v7352
  %v7422 = vpack.c.b16 %v7355, %v7354
  %v7423 = vpack.c.b16 %v7357, %v7356
  %v7424 = vpack.c.b16 %v7359, %v7358
  %v7425 = vpack.c.b16 %v7361, %v7360
  %v7426 = vpack.c.b16 %v7363, %v7362
  %v7427 = vpack.c.b16 %v7365, %v7364
  %v7428 = vpack.c.b16 %v7367, %v7366
  %v7429 = vpack.c.b16 %v7369, %v7368
  %v7430 = vpack.c.b16 %v7371, %v7370
  %v7431 = vpack.c.b16 %v7373, %v7372
  %v7432 = vpack.c.b16 %v7375, %v7374
  %v7433 = vpack.c.b16 %v7377, %v7376
  %v7434 = vpack.c.b16 %v7379, %v7378
  %v7435 = vpack.c.b16 %v7381, %v7380
  %v7436 = vpack.c.b16 %v7383, %v7382
  %v7437 = vpack.c.b16 %v7385, %v7384
  %v7438 = vpack.c.b16 %v7387, %v7386
  %v7439 = vpack.c.b16 %v7389, %v7388
  %v7440 = vpack.c.b16 %v7391, %v7390
  %v7441 = vpack.c.b16 %v7393, %v7392
  %v7442 = vpack.c.b16 %v7395, %v7394
  %v7443 = vpack.c.b16 %v7397, %v7396
  %v7444 = vpack.c.b16 %v7399, %v7398
  %v7445 = vpack.c.b16 %v7401, %v7400
  %v7446 = vpack.c.b16 %v7403, %v7402
  %v7447 = vpack.c.b16 %v7405, %v7404
  %v7448 = vpack.c.b16 %v7407, %v7406
  %v7449 = vpack.c.b16 %v7409, %v7408
  %7490 = vmatprep.subr.bf16.mxu0 0
  %7491 = vmatpush1.bf16.msra.mxu0 %v7410
  %7492 = vmatprep.subr.bf16.mxu0 0
  %7493 = vmatpush1.bf16.msra.mxu0 %v7411
  %7494 = vmatprep.subr.bf16.mxu0 0
  %7495 = vmatpush1.bf16.msra.mxu0 %v7412
  %7496 = vmatprep.subr.bf16.mxu0 0
  %7497 = vmatpush1.bf16.msra.mxu0 %v7413
  %7498 = vmatprep.subr.bf16.mxu0 0
  %7499 = vmatpush1.bf16.msra.mxu0 %v7414
  %7500 = vmatprep.subr.bf16.mxu0 0
  %7501 = vmatpush1.bf16.msra.mxu0 %v7415
  %7502 = vmatprep.subr.bf16.mxu0 0
  %7503 = vmatpush1.bf16.msra.mxu0 %v7416
  %7504 = vmatprep.subr.bf16.mxu0 0
  %7505 = vmatpush1.bf16.msra.mxu0 %v7417
  %7506 = vmatprep.subr.bf16.mxu0 0
  %7507 = vmatpush1.bf16.msra.mxu0 %v7418
  %7508 = vmatprep.subr.bf16.mxu0 0
  %7509 = vmatpush1.bf16.msra.mxu0 %v7419
  %7510 = vmatprep.subr.bf16.mxu0 0
  %7511 = vmatpush1.bf16.msra.mxu0 %v7420
  %7512 = vmatprep.subr.bf16.mxu0 0
  %7513 = vmatpush1.bf16.msra.mxu0 %v7421
  %7514 = vmatprep.subr.bf16.mxu0 0
  %7515 = vmatpush1.bf16.msra.mxu0 %v7422
  %7516 = vmatprep.subr.bf16.mxu0 0
  %7517 = vmatpush1.bf16.msra.mxu0 %v7423
  %7518 = vmatprep.subr.bf16.mxu0 0
  %7519 = vmatpush1.bf16.msra.mxu0 %v7424
  %7520 = vmatprep.subr.bf16.mxu0 0
  %7521 = vmatpush1.bf16.msra.mxu0 %v7425
  %7522 = vmatprep.mubr.bf16.mxu0 %v3134
  %7523 = vmatmul.mubr.bf16.gmra.mrb[0].mxu0 %v3131
  %v7524 = vpop.f32.mrb[0].mxu0
  %v7525 = vadd.f32 0.0, %v7524
  %v7526 = vpop.f32.mrb[0].mxu0
  %v7527 = vpop.f32.mrb[0].mxu0
  %v7528 = vadd.f32 0.0, %v7527
  %v7529 = vpop.f32.mrb[0].mxu0
  %7530 = vmatprep.mubr.bf16.mxu0 %v3149
  %7531 = vmatmul.mubr.bf16.gmra.mrb[0].mxu0 %v3146
  %v7532 = vpop.f32.mrb[0].mxu0
  %v7533 = vadd.f32 0.0, %v7532
  %v7534 = vpop.f32.mrb[0].mxu0
  %v7535 = vpop.f32.mrb[0].mxu0
  %v7536 = vadd.f32 0.0, %v7535
  %v7537 = vpop.f32.mrb[0].mxu0
  %7538 = vmatprep.mubr.bf16.mxu0 %v3164
  %7539 = vmatmul.mubr.bf16.gmra.mrb[0].mxu0 %v3161
  %v7540 = vpop.f32.mrb[0].mxu0
  %v7541 = vadd.f32 0.0, %v7540
  %v7542 = vpop.f32.mrb[0].mxu0
  %v7543 = vpop.f32.mrb[0].mxu0
  %v7544 = vadd.f32 0.0, %v7543
  %v7545 = vpop.f32.mrb[0].mxu0
  %7546 = vmatprep.mubr.bf16.mxu0 %v3179
  %7547 = vmatmul.mubr.bf16.gmra.mrb[0].mxu0 %v3176
  %v7548 = vpop.f32.mrb[0].mxu0
  %v7549 = vadd.f32 0.0, %v7548
  %v7550 = vpop.f32.mrb[0].mxu0
  %v7551 = vpop.f32.mrb[0].mxu0
  %v7552 = vadd.f32 0.0, %v7551
  %v7553 = vpop.f32.mrb[0].mxu0
  %7554 = vmatprep.mubr.bf16.mxu0 %v3194
  %7555 = vmatmul.mubr.bf16.gmra.mrb[0].mxu0 %v3191
  %v7556 = vpop.f32.mrb[0].mxu0
  %v7557 = vadd.f32 0.0, %v7556
  %v7558 = vpop.f32.mrb[0].mxu0
  %v7559 = vpop.f32.mrb[0].mxu0
  %v7560 = vadd.f32 0.0, %v7559
  %v7561 = vpop.f32.mrb[0].mxu0
  %7562 = vmatprep.mubr.bf16.mxu0 %v3209
  %7563 = vmatmul.mubr.bf16.gmra.mrb[0].mxu0 %v3206
  %v7564 = vpop.f32.mrb[0].mxu0
  %v7565 = vadd.f32 0.0, %v7564
  %v7566 = vpop.f32.mrb[0].mxu0
  %v7567 = vpop.f32.mrb[0].mxu0
  %v7568 = vadd.f32 0.0, %v7567
  %v7569 = vpop.f32.mrb[0].mxu0
  %7570 = vmatprep.mubr.bf16.mxu0 %v3224
  %7571 = vmatmul.mubr.bf16.gmra.mrb[0].mxu0 %v3221
  %v7572 = vpop.f32.mrb[0].mxu0
  %v7573 = vadd.f32 0.0, %v7572
  %v7574 = vpop.f32.mrb[0].mxu0
  %v7575 = vpop.f32.mrb[0].mxu0
  %v7576 = vadd.f32 0.0, %v7575
  %v7577 = vpop.f32.mrb[0].mxu0
  %7578 = vmatprep.mubr.bf16.mxu0 %v3239
  %7579 = vmatmul.mubr.bf16.gmra.mrb[0].mxu0 %v3236
  %v7580 = vpop.f32.mrb[0].mxu0
  %v7581 = vadd.f32 0.0, %v7580
  %v7582 = vpop.f32.mrb[0].mxu0
  %v7583 = vpop.f32.mrb[0].mxu0
  %v7584 = vadd.f32 0.0, %v7583
  %v7585 = vpop.f32.mrb[0].mxu0
  %7586 = vmatprep.mubr.bf16.mxu0 %v3254
  %7587 = vmatmul.mubr.bf16.gmra.mrb[0].mxu0 %v3251
  %v7588 = vpop.f32.mrb[0].mxu0
  %v7589 = vadd.f32 0.0, %v7588
  %v7590 = vpop.f32.mrb[0].mxu0
  %v7591 = vpop.f32.mrb[0].mxu0
  %v7592 = vadd.f32 0.0, %v7591
  %v7593 = vpop.f32.mrb[0].mxu0
  %7594 = vmatprep.mubr.bf16.mxu0 %v3269
  %7595 = vmatmul.mubr.bf16.gmra.mrb[0].mxu0 %v3266
  %v7596 = vpop.f32.mrb[0].mxu0
  %v7597 = vadd.f32 0.0, %v7596
  %v7598 = vpop.f32.mrb[0].mxu0
  %v7599 = vpop.f32.mrb[0].mxu0
  %v7600 = vadd.f32 0.0, %v7599
  %v7601 = vpop.f32.mrb[0].mxu0
  %7602 = vmatprep.mubr.bf16.mxu0 %v3344
  %7603 = vmatmul.mubr.bf16.gmra.mrb[0].mxu0 %v3341
  %v7604 = vpop.f32.mrb[0].mxu0
  %v7605 = vadd.f32 0.0, %v7604
  %v7606 = vpop.f32.mrb[0].mxu0
  %v7607 = vpop.f32.mrb[0].mxu0
  %v7608 = vadd.f32 0.0, %v7607
  %v7609 = vpop.f32.mrb[0].mxu0
  %7610 = vmatprep.mubr.bf16.mxu0 %v3359
  %7611 = vmatmul.mubr.bf16.gmra.mrb[0].mxu0 %v3356
  %v7612 = vpop.f32.mrb[0].mxu0
  %v7613 = vadd.f32 0.0, %v7612
  %v7614 = vpop.f32.mrb[0].mxu0
  %v7615 = vpop.f32.mrb[0].mxu0
  %v7616 = vadd.f32 0.0, %v7615
  %v7617 = vpop.f32.mrb[0].mxu0
  %7618 = vmatprep.mubr.bf16.mxu0 %v3374
  %7619 = vmatmul.mubr.bf16.gmra.mrb[0].mxu0 %v3371
  %v7620 = vpop.f32.mrb[0].mxu0
  %v7621 = vadd.f32 0.0, %v7620
  %v7622 = vpop.f32.mrb[0].mxu0
  %v7623 = vpop.f32.mrb[0].mxu0
  %v7624 = vadd.f32 0.0, %v7623
  %v7625 = vpop.f32.mrb[0].mxu0
  %7626 = vmatprep.mubr.bf16.mxu0 %v3389
  %7627 = vmatmul.mubr.bf16.gmra.mrb[0].mxu0 %v3386
  %v7628 = vpop.f32.mrb[0].mxu0
  %v7629 = vadd.f32 0.0, %v7628
  %v7630 = vpop.f32.mrb[0].mxu0
  %v7631 = vpop.f32.mrb[0].mxu0
  %v7632 = vadd.f32 0.0, %v7631
  %v7633 = vpop.f32.mrb[0].mxu0
  %7634 = vmatprep.mubr.bf16.mxu0 %v3404
  %7635 = vmatmul.mubr.bf16.gmra.mrb[0].mxu0 %v3401
  %v7636 = vpop.f32.mrb[0].mxu0
  %v7637 = vadd.f32 0.0, %v7636
  %v7638 = vpop.f32.mrb[0].mxu0
  %v7639 = vpop.f32.mrb[0].mxu0
  %v7640 = vadd.f32 0.0, %v7639
  %v7641 = vpop.f32.mrb[0].mxu0
  %7642 = vmatprep.mubr.bf16.mxu0 %v3419
  %7643 = vmatmul.mubr.bf16.gmra.mrb[0].mxu0 %v3416
  %v7644 = vpop.f32.mrb[0].mxu0
  %v7645 = vadd.f32 0.0, %v7644
  %v7646 = vpop.f32.mrb[0].mxu0
  %v7647 = vpop.f32.mrb[0].mxu0
  %v7648 = vadd.f32 0.0, %v7647
  %v7649 = vpop.f32.mrb[0].mxu0
  %7650 = vmatprep.mubr.bf16.mxu0 %v3434
  %7651 = vmatmul.mubr.bf16.gmra.mrb[0].mxu0 %v3431
  %v7652 = vpop.f32.mrb[0].mxu0
  %v7653 = vadd.f32 0.0, %v7652
  %v7654 = vpop.f32.mrb[0].mxu0
  %v7655 = vpop.f32.mrb[0].mxu0
  %v7656 = vadd.f32 0.0, %v7655
  %v7657 = vpop.f32.mrb[0].mxu0
  %7658 = vmatprep.mubr.bf16.mxu0 %v3449
  %7659 = vmatmul.mubr.bf16.gmra.mrb[0].mxu0 %v3446
  %v7660 = vpop.f32.mrb[0].mxu0
  %v7661 = vadd.f32 0.0, %v7660
  %v7662 = vpop.f32.mrb[0].mxu0
  %v7663 = vpop.f32.mrb[0].mxu0
  %v7664 = vadd.f32 0.0, %v7663
  %v7665 = vpop.f32.mrb[0].mxu0
  %7666 = vmatprep.mubr.bf16.mxu0 %v3464
  %7667 = vmatmul.mubr.bf16.gmra.mrb[0].mxu0 %v3461
  %v7668 = vpop.f32.mrb[0].mxu0
  %v7669 = vadd.f32 0.0, %v7668
  %v7670 = vpop.f32.mrb[0].mxu0
  %v7671 = vpop.f32.mrb[0].mxu0
  %v7672 = vadd.f32 0.0, %v7671
  %v7673 = vpop.f32.mrb[0].mxu0
  %7674 = vmatprep.mubr.bf16.mxu0 %v3479
  %7675 = vmatmul.mubr.bf16.gmra.mrb[0].mxu0 %v3476
  %v7676 = vpop.f32.mrb[0].mxu0
  %v7677 = vadd.f32 0.0, %v7676
  %v7678 = vpop.f32.mrb[0].mxu0
  %v7679 = vpop.f32.mrb[0].mxu0
  %v7680 = vadd.f32 0.0, %v7679
  %v7681 = vpop.f32.mrb[0].mxu0
  %7682 = vdwg.mxu0
  %7683 = vmatprep.subr.bf16.mxu0 0
  %7684 = vmatpush1.bf16.msra.mxu0 %v7426
  %7685 = vmatprep.subr.bf16.mxu0 0
  %7686 = vmatpush1.bf16.msra.mxu0 %v7427
  %7687 = vmatprep.subr.bf16.mxu0 0
  %7688 = vmatpush1.bf16.msra.mxu0 %v7428
  %7689 = vmatprep.subr.bf16.mxu0 0
  %7690 = vmatpush1.bf16.msra.mxu0 %v7429
  %7691 = vmatprep.subr.bf16.mxu0 0
  %7692 = vmatpush1.bf16.msra.mxu0 %v7430
  %7693 = vmatprep.subr.bf16.mxu0 0
  %7694 = vmatpush1.bf16.msra.mxu0 %v7431
  %7695 = vmatprep.subr.bf16.mxu0 0
  %7696 = vmatpush1.bf16.msra.mxu0 %v7432
  %7697 = vmatprep.subr.bf16.mxu0 0
  %7698 = vmatpush1.bf16.msra.mxu0 %v7433
  %7699 = vmatprep.subr.bf16.mxu0 0
  %7700 = vmatpush1.bf16.msra.mxu0 %v7434
  %7701 = vmatprep.subr.bf16.mxu0 0
  %7702 = vmatpush1.bf16.msra.mxu0 %v7435
  %7703 = vmatprep.subr.bf16.mxu0 0
  %7704 = vmatpush1.bf16.msra.mxu0 %v7436
  %7705 = vmatprep.subr.bf16.mxu0 0
  %7706 = vmatpush1.bf16.msra.mxu0 %v7437
  %7707 = vmatprep.subr.bf16.mxu0 0
  %7708 = vmatpush1.bf16.msra.mxu0 %v7438
  %7709 = vmatprep.subr.bf16.mxu0 0
  %7710 = vmatpush1.bf16.msra.mxu0 %v7439
  %7711 = vmatprep.subr.bf16.mxu0 0
  %7712 = vmatpush1.bf16.msra.mxu0 %v7440
  %7713 = vmatprep.subr.bf16.mxu0 0
  %7714 = vmatpush1.bf16.msra.mxu0 %v7441
  %7715 = vmatprep.mubr.bf16.mxu0 %v3140
  %7716 = vmatmul.mubr.bf16.gmra.mrb[0].mxu0 %v3137
  %v7717 = vpop.f32.mrb[0].mxu0
  %v7718 = vadd.f32 %v7525, %v7717
  %v7719 = vpop.f32.mrb[0].mxu0
  %v7720 = vpop.f32.mrb[0].mxu0
  %v7721 = vadd.f32 %v7528, %v7720
  %v7722 = vpop.f32.mrb[0].mxu0
  %7723 = vmatprep.mubr.bf16.mxu0 %v3155
  %7724 = vmatmul.mubr.bf16.gmra.mrb[0].mxu0 %v3152
  %v7725 = vpop.f32.mrb[0].mxu0
  %v7726 = vadd.f32 %v7533, %v7725
  %v7727 = vpop.f32.mrb[0].mxu0
  %v7728 = vpop.f32.mrb[0].mxu0
  %v7729 = vadd.f32 %v7536, %v7728
  %v7730 = vpop.f32.mrb[0].mxu0
  %7731 = vmatprep.mubr.bf16.mxu0 %v3170
  %7732 = vmatmul.mubr.bf16.gmra.mrb[0].mxu0 %v3167
  %v7733 = vpop.f32.mrb[0].mxu0
  %v7734 = vadd.f32 %v7541, %v7733
  %v7735 = vpop.f32.mrb[0].mxu0
  %v7736 = vpop.f32.mrb[0].mxu0
  %v7737 = vadd.f32 %v7544, %v7736
  %v7738 = vpop.f32.mrb[0].mxu0
  %7739 = vmatprep.mubr.bf16.mxu0 %v3185
  %7740 = vmatmul.mubr.bf16.gmra.mrb[0].mxu0 %v3182
  %v7741 = vpop.f32.mrb[0].mxu0
  %v7742 = vadd.f32 %v7549, %v7741
  %v7743 = vpop.f32.mrb[0].mxu0
  %v7744 = vpop.f32.mrb[0].mxu0
  %v7745 = vadd.f32 %v7552, %v7744
  %v7746 = vpop.f32.mrb[0].mxu0
  %7747 = vmatprep.mubr.bf16.mxu0 %v3200
  %7748 = vmatmul.mubr.bf16.gmra.mrb[0].mxu0 %v3197
  %v7749 = vpop.f32.mrb[0].mxu0
  %v7750 = vadd.f32 %v7557, %v7749
  %v7751 = vpop.f32.mrb[0].mxu0
  %v7752 = vpop.f32.mrb[0].mxu0
  %v7753 = vadd.f32 %v7560, %v7752
  %v7754 = vpop.f32.mrb[0].mxu0
  %7755 = vmatprep.mubr.bf16.mxu0 %v3215
  %7756 = vmatmul.mubr.bf16.gmra.mrb[0].mxu0 %v3212
  %v7757 = vpop.f32.mrb[0].mxu0
  %v7758 = vadd.f32 %v7565, %v7757
  %v7759 = vpop.f32.mrb[0].mxu0
  %v7760 = vpop.f32.mrb[0].mxu0
  %v7761 = vadd.f32 %v7568, %v7760
  %v7762 = vpop.f32.mrb[0].mxu0
  %7763 = vmatprep.mubr.bf16.mxu0 %v3230
  %7764 = vmatmul.mubr.bf16.gmra.mrb[0].mxu0 %v3227
  %v7765 = vpop.f32.mrb[0].mxu0
  %v7766 = vadd.f32 %v7573, %v7765
  %v7767 = vpop.f32.mrb[0].mxu0
  %v7768 = vpop.f32.mrb[0].mxu0
  %v7769 = vadd.f32 %v7576, %v7768
  %v7770 = vpop.f32.mrb[0].mxu0
  %7771 = vmatprep.mubr.bf16.mxu0 %v3245
  %7772 = vmatmul.mubr.bf16.gmra.mrb[0].mxu0 %v3242
  %v7773 = vpop.f32.mrb[0].mxu0
  %v7774 = vadd.f32 %v7581, %v7773
  %v7775 = vpop.f32.mrb[0].mxu0
  %v7776 = vpop.f32.mrb[0].mxu0
  %v7777 = vadd.f32 %v7584, %v7776
  %v7778 = vpop.f32.mrb[0].mxu0
  %7779 = vmatprep.mubr.bf16.mxu0 %v3260
  %7780 = vmatmul.mubr.bf16.gmra.mrb[0].mxu0 %v3257
  %v7781 = vpop.f32.mrb[0].mxu0
  %v7782 = vadd.f32 %v7589, %v7781
  %v7783 = vpop.f32.mrb[0].mxu0
  %v7784 = vpop.f32.mrb[0].mxu0
  %v7785 = vadd.f32 %v7592, %v7784
  %v7786 = vpop.f32.mrb[0].mxu0
  %7787 = vmatprep.mubr.bf16.mxu0 %v3275
  %7788 = vmatmul.mubr.bf16.gmra.mrb[0].mxu0 %v3272
  %v7789 = vpop.f32.mrb[0].mxu0
  %v7790 = vadd.f32 %v7597, %v7789
  %v7791 = vpop.f32.mrb[0].mxu0
  %v7792 = vpop.f32.mrb[0].mxu0
  %v7793 = vadd.f32 %v7600, %v7792
  %v7794 = vpop.f32.mrb[0].mxu0
  %7795 = vmatprep.mubr.bf16.mxu0 %v3350
  %7796 = vmatmul.mubr.bf16.gmra.mrb[0].mxu0 %v3347
  %v7797 = vpop.f32.mrb[0].mxu0
  %v7798 = vadd.f32 %v7605, %v7797
  %v7799 = vpop.f32.mrb[0].mxu0
  %v7800 = vpop.f32.mrb[0].mxu0
  %v7801 = vadd.f32 %v7608, %v7800
  %v7802 = vpop.f32.mrb[0].mxu0
  %7803 = vmatprep.mubr.bf16.mxu0 %v3365
  %7804 = vmatmul.mubr.bf16.gmra.mrb[0].mxu0 %v3362
  %v7805 = vpop.f32.mrb[0].mxu0
  %v7806 = vadd.f32 %v7613, %v7805
  %v7807 = vpop.f32.mrb[0].mxu0
  %v7808 = vpop.f32.mrb[0].mxu0
  %v7809 = vadd.f32 %v7616, %v7808
  %v7810 = vpop.f32.mrb[0].mxu0
  %7811 = vmatprep.mubr.bf16.mxu0 %v3380
  %7812 = vmatmul.mubr.bf16.gmra.mrb[0].mxu0 %v3377
  %v7813 = vpop.f32.mrb[0].mxu0
  %v7814 = vadd.f32 %v7621, %v7813
  %v7815 = vpop.f32.mrb[0].mxu0
  %v7816 = vpop.f32.mrb[0].mxu0
  %v7817 = vadd.f32 %v7624, %v7816
  %v7818 = vpop.f32.mrb[0].mxu0
  %7819 = vmatprep.mubr.bf16.mxu0 %v3395
  %7820 = vmatmul.mubr.bf16.gmra.mrb[0].mxu0 %v3392
  %v7821 = vpop.f32.mrb[0].mxu0
  %v7822 = vadd.f32 %v7629, %v7821
  %v7823 = vpop.f32.mrb[0].mxu0
  %v7824 = vpop.f32.mrb[0].mxu0
  %v7825 = vadd.f32 %v7632, %v7824
  %v7826 = vpop.f32.mrb[0].mxu0
  %7827 = vmatprep.mubr.bf16.mxu0 %v3410
  %7828 = vmatmul.mubr.bf16.gmra.mrb[0].mxu0 %v3407
  %v7829 = vpop.f32.mrb[0].mxu0
  %v7830 = vadd.f32 %v7637, %v7829
  %v7831 = vpop.f32.mrb[0].mxu0
  %v7832 = vpop.f32.mrb[0].mxu0
  %v7833 = vadd.f32 %v7640, %v7832
  %v7834 = vpop.f32.mrb[0].mxu0
  %7835 = vmatprep.mubr.bf16.mxu0 %v3425
  %7836 = vmatmul.mubr.bf16.gmra.mrb[0].mxu0 %v3422
  %v7837 = vpop.f32.mrb[0].mxu0
  %v7838 = vadd.f32 %v7645, %v7837
  %v7839 = vpop.f32.mrb[0].mxu0
  %v7840 = vpop.f32.mrb[0].mxu0
  %v7841 = vadd.f32 %v7648, %v7840
  %v7842 = vpop.f32.mrb[0].mxu0
  %7843 = vmatprep.mubr.bf16.mxu0 %v3440
  %7844 = vmatmul.mubr.bf16.gmra.mrb[0].mxu0 %v3437
  %v7845 = vpop.f32.mrb[0].mxu0
  %v7846 = vadd.f32 %v7653, %v7845
  %v7847 = vpop.f32.mrb[0].mxu0
  %v7848 = vpop.f32.mrb[0].mxu0
  %v7849 = vadd.f32 %v7656, %v7848
  %v7850 = vpop.f32.mrb[0].mxu0
  %7851 = vmatprep.mubr.bf16.mxu0 %v3455
  %7852 = vmatmul.mubr.bf16.gmra.mrb[0].mxu0 %v3452
  %v7853 = vpop.f32.mrb[0].mxu0
  %v7854 = vadd.f32 %v7661, %v7853
  %v7855 = vpop.f32.mrb[0].mxu0
  %v7856 = vpop.f32.mrb[0].mxu0
  %v7857 = vadd.f32 %v7664, %v7856
  %v7858 = vpop.f32.mrb[0].mxu0
  %7859 = vmatprep.mubr.bf16.mxu0 %v3470
  %7860 = vmatmul.mubr.bf16.gmra.mrb[0].mxu0 %v3467
  %v7861 = vpop.f32.mrb[0].mxu0
  %v7862 = vadd.f32 %v7669, %v7861
  %v7863 = vpop.f32.mrb[0].mxu0
  %v7864 = vpop.f32.mrb[0].mxu0
  %v7865 = vadd.f32 %v7672, %v7864
  %v7866 = vpop.f32.mrb[0].mxu0
  %7867 = vmatprep.mubr.bf16.mxu0 %v3485
  %7868 = vmatmul.mubr.bf16.gmra.mrb[0].mxu0 %v3482
  %v7869 = vpop.f32.mrb[0].mxu0
  %v7870 = vadd.f32 %v7677, %v7869
  %v7871 = vpop.f32.mrb[0].mxu0
  %v7872 = vpop.f32.mrb[0].mxu0
  %v7873 = vadd.f32 %v7680, %v7872
  %v7874 = vpop.f32.mrb[0].mxu0
  %7875 = vdwg.mxu0
  %7876 = vmatprep.subr.bf16.mxu0 0
  %7877 = vmatpush1.bf16.msra.mxu0 %v7442
  %7878 = vmatprep.subr.bf16.mxu0 0
  %7879 = vmatpush1.bf16.msra.mxu0 %v7443
  %7880 = vmatprep.subr.bf16.mxu0 0
  %7881 = vmatpush1.bf16.msra.mxu0 %v7444
  %7882 = vmatprep.subr.bf16.mxu0 0
  %7883 = vmatpush1.bf16.msra.mxu0 %v7445
  %7884 = vmatprep.subr.bf16.mxu0 0
  %7885 = vmatpush1.bf16.msra.mxu0 %v7446
  %7886 = vmatprep.subr.bf16.mxu0 0
  %7887 = vmatpush1.bf16.msra.mxu0 %v7447
  %7888 = vmatprep.subr.bf16.mxu0 0
  %7889 = vmatpush1.bf16.msra.mxu0 %v7448
  %7890 = vmatprep.subr.bf16.mxu0 0
  %7891 = vmatpush1.bf16.msra.mxu0 %v7449
  %7892 = vmatprep.subr.bf16.mxu0 0
  %7893 = vmatpush1.bf16.msra.mxu0 0
  %7894 = vmatprep.subr.bf16.mxu0 0
  %7895 = vmatpush1.bf16.msra.mxu0 0
  %7896 = vmatprep.subr.bf16.mxu0 0
  %7897 = vmatpush1.bf16.msra.mxu0 0
  %7898 = vmatprep.subr.bf16.mxu0 0
  %7899 = vmatpush1.bf16.msra.mxu0 0
  %7900 = vmatprep.subr.bf16.mxu0 0
  %7901 = vmatpush1.bf16.msra.mxu0 0
  %7902 = vmatprep.subr.bf16.mxu0 0
  %7903 = vmatpush1.bf16.msra.mxu0 0
  %7904 = vmatprep.subr.bf16.mxu0 0
  %7905 = vmatpush1.bf16.msra.mxu0 0
  %7906 = vmatprep.subr.bf16.mxu0 0
  %7907 = vmatpush1.bf16.msra.mxu0 0
  %7908 = vmatprep.mubr.bf16.mxu0 0
  %7909 = vmatmul.mubr.bf16.gmra.mrb[0].mxu0 %v3143
  %v7910 = vpop.f32.mrb[0].mxu0
  %v7911 = vadd.f32 %v7718, %v7910
  %v7912 = vpop.f32.mrb[0].mxu0
  %v7913 = vpop.f32.mrb[0].mxu0
  %v7914 = vadd.f32 %v7721, %v7913
  %v7915 = vpop.f32.mrb[0].mxu0
  %7916 = vmatprep.mubr.bf16.mxu0 0
  %7917 = vmatmul.mubr.bf16.gmra.mrb[0].mxu0 %v3158
  %v7918 = vpop.f32.mrb[0].mxu0
  %v7919 = vadd.f32 %v7726, %v7918
  %v7920 = vpop.f32.mrb[0].mxu0
  %v7921 = vpop.f32.mrb[0].mxu0
  %v7922 = vadd.f32 %v7729, %v7921
  %v7923 = vpop.f32.mrb[0].mxu0
  %7924 = vmatprep.mubr.bf16.mxu0 0
  %7925 = vmatmul.mubr.bf16.gmra.mrb[0].mxu0 %v3173
  %v7926 = vpop.f32.mrb[0].mxu0
  %v7927 = vadd.f32 %v7734, %v7926
  %v7928 = vpop.f32.mrb[0].mxu0
  %v7929 = vpop.f32.mrb[0].mxu0
  %v7930 = vadd.f32 %v7737, %v7929
  %v7931 = vpop.f32.mrb[0].mxu0
  %7932 = vmatprep.mubr.bf16.mxu0 0
  %7933 = vmatmul.mubr.bf16.gmra.mrb[0].mxu0 %v3188
  %v7934 = vpop.f32.mrb[0].mxu0
  %v7935 = vadd.f32 %v7742, %v7934
  %v7936 = vpop.f32.mrb[0].mxu0
  %v7937 = vpop.f32.mrb[0].mxu0
  %v7938 = vadd.f32 %v7745, %v7937
  %v7939 = vpop.f32.mrb[0].mxu0
  %7940 = vmatprep.mubr.bf16.mxu0 0
  %7941 = vmatmul.mubr.bf16.gmra.mrb[0].mxu0 %v3203
  %v7942 = vpop.f32.mrb[0].mxu0
  %v7943 = vadd.f32 %v7750, %v7942
  %v7944 = vpop.f32.mrb[0].mxu0
  %v7945 = vpop.f32.mrb[0].mxu0
  %v7946 = vadd.f32 %v7753, %v7945
  %v7947 = vpop.f32.mrb[0].mxu0
  %7948 = vmatprep.mubr.bf16.mxu0 0
  %7949 = vmatmul.mubr.bf16.gmra.mrb[0].mxu0 %v3218
  %v7950 = vpop.f32.mrb[0].mxu0
  %v7951 = vadd.f32 %v7758, %v7950
  %v7952 = vpop.f32.mrb[0].mxu0
  %v7953 = vpop.f32.mrb[0].mxu0
  %v7954 = vadd.f32 %v7761, %v7953
  %v7955 = vpop.f32.mrb[0].mxu0
  %7956 = vmatprep.mubr.bf16.mxu0 0
  %7957 = vmatmul.mubr.bf16.gmra.mrb[0].mxu0 %v3233
  %v7958 = vpop.f32.mrb[0].mxu0
  %v7959 = vadd.f32 %v7766, %v7958
  %v7960 = vpop.f32.mrb[0].mxu0
  %v7961 = vpop.f32.mrb[0].mxu0
  %v7962 = vadd.f32 %v7769, %v7961
  %v7963 = vpop.f32.mrb[0].mxu0
  %7964 = vmatprep.mubr.bf16.mxu0 0
  %7965 = vmatmul.mubr.bf16.gmra.mrb[0].mxu0 %v3248
  %v7966 = vpop.f32.mrb[0].mxu0
  %v7967 = vadd.f32 %v7774, %v7966
  %v7968 = vpop.f32.mrb[0].mxu0
  %v7969 = vpop.f32.mrb[0].mxu0
  %v7970 = vadd.f32 %v7777, %v7969
  %v7971 = vpop.f32.mrb[0].mxu0
  %7972 = vmatprep.mubr.bf16.mxu0 0
  %7973 = vmatmul.mubr.bf16.gmra.mrb[0].mxu0 %v3263
  %v7974 = vpop.f32.mrb[0].mxu0
  %v7975 = vadd.f32 %v7782, %v7974
  %v7976 = vpop.f32.mrb[0].mxu0
  %v7977 = vpop.f32.mrb[0].mxu0
  %v7978 = vadd.f32 %v7785, %v7977
  %v7979 = vpop.f32.mrb[0].mxu0
  %7980 = vmatprep.mubr.bf16.mxu0 0
  %7981 = vmatmul.mubr.bf16.gmra.mrb[0].mxu0 %v3278
  %v7982 = vpop.f32.mrb[0].mxu0
  %v7983 = vadd.f32 %v7790, %v7982
  %v7984 = vpop.f32.mrb[0].mxu0
  %v7985 = vpop.f32.mrb[0].mxu0
  %v7986 = vadd.f32 %v7793, %v7985
  %v7987 = vpop.f32.mrb[0].mxu0
  %7988 = vmatprep.mubr.bf16.mxu0 0
  %7989 = vmatmul.mubr.bf16.gmra.mrb[0].mxu0 %v3353
  %v7990 = vpop.f32.mrb[0].mxu0
  %v7991 = vadd.f32 %v7798, %v7990
  %v7992 = vpop.f32.mrb[0].mxu0
  %v7993 = vpop.f32.mrb[0].mxu0
  %v7994 = vadd.f32 %v7801, %v7993
  %v7995 = vpop.f32.mrb[0].mxu0
  %7996 = vmatprep.mubr.bf16.mxu0 0
  %7997 = vmatmul.mubr.bf16.gmra.mrb[0].mxu0 %v3368
  %v7998 = vpop.f32.mrb[0].mxu0
  %v7999 = vadd.f32 %v7806, %v7998
  %v8000 = vpop.f32.mrb[0].mxu0
  %v8001 = vpop.f32.mrb[0].mxu0
  %v8002 = vadd.f32 %v7809, %v8001
  %v8003 = vpop.f32.mrb[0].mxu0
  %8004 = vmatprep.mubr.bf16.mxu0 0
  %8005 = vmatmul.mubr.bf16.gmra.mrb[0].mxu0 %v3383
  %v8006 = vpop.f32.mrb[0].mxu0
  %v8007 = vadd.f32 %v7814, %v8006
  %v8008 = vpop.f32.mrb[0].mxu0
  %v8009 = vpop.f32.mrb[0].mxu0
  %v8010 = vadd.f32 %v7817, %v8009
  %v8011 = vpop.f32.mrb[0].mxu0
  %8012 = vmatprep.mubr.bf16.mxu0 0
  %8013 = vmatmul.mubr.bf16.gmra.mrb[0].mxu0 %v3398
  %v8014 = vpop.f32.mrb[0].mxu0
  %v8015 = vadd.f32 %v7822, %v8014
  %v8016 = vpop.f32.mrb[0].mxu0
  %v8017 = vpop.f32.mrb[0].mxu0
  %v8018 = vadd.f32 %v7825, %v8017
  %v8019 = vpop.f32.mrb[0].mxu0
  %8020 = vmatprep.mubr.bf16.mxu0 0
  %8021 = vmatmul.mubr.bf16.gmra.mrb[0].mxu0 %v3413
  %v8022 = vpop.f32.mrb[0].mxu0
  %v8023 = vadd.f32 %v7830, %v8022
  %v8024 = vpop.f32.mrb[0].mxu0
  %v8025 = vpop.f32.mrb[0].mxu0
  %v8026 = vadd.f32 %v7833, %v8025
  %v8027 = vpop.f32.mrb[0].mxu0
  %8028 = vmatprep.mubr.bf16.mxu0 0
  %8029 = vmatmul.mubr.bf16.gmra.mrb[0].mxu0 %v3428
  %v8030 = vpop.f32.mrb[0].mxu0
  %v8031 = vadd.f32 %v7838, %v8030
  %v8032 = vpop.f32.mrb[0].mxu0
  %v8033 = vpop.f32.mrb[0].mxu0
  %v8034 = vadd.f32 %v7841, %v8033
  %v8035 = vpop.f32.mrb[0].mxu0
  %8036 = vmatprep.mubr.bf16.mxu0 0
  %8037 = vmatmul.mubr.bf16.gmra.mrb[0].mxu0 %v3443
  %v8038 = vpop.f32.mrb[0].mxu0
  %v8039 = vadd.f32 %v7846, %v8038
  %v8040 = vpop.f32.mrb[0].mxu0
  %v8041 = vpop.f32.mrb[0].mxu0
  %v8042 = vadd.f32 %v7849, %v8041
  %v8043 = vpop.f32.mrb[0].mxu0
  %8044 = vmatprep.mubr.bf16.mxu0 0
  %8045 = vmatmul.mubr.bf16.gmra.mrb[0].mxu0 %v3458
  %v8046 = vpop.f32.mrb[0].mxu0
  %v8047 = vadd.f32 %v7854, %v8046
  %v8048 = vpop.f32.mrb[0].mxu0
  %v8049 = vpop.f32.mrb[0].mxu0
  %v8050 = vadd.f32 %v7857, %v8049
  %v8051 = vpop.f32.mrb[0].mxu0
  %8052 = vmatprep.mubr.bf16.mxu0 0
  %8053 = vmatmul.mubr.bf16.gmra.mrb[0].mxu0 %v3473
  %v8054 = vpop.f32.mrb[0].mxu0
  %v8055 = vadd.f32 %v7862, %v8054
  %v8056 = vpop.f32.mrb[0].mxu0
  %v8057 = vpop.f32.mrb[0].mxu0
  %v8058 = vadd.f32 %v7865, %v8057
  %v8059 = vpop.f32.mrb[0].mxu0
  %8060 = vmatprep.mubr.bf16.mxu0 0
  %8061 = vmatmul.mubr.bf16.gmra.mrb[0].mxu0 %v3488
  %v8062 = vpop.f32.mrb[0].mxu0
  %v8063 = vadd.f32 %v7870, %v8062
  %v8064 = vpop.f32.mrb[0].mxu0
  %v8065 = vpop.f32.mrb[0].mxu0
  %v8066 = vadd.f32 %v7873, %v8065
  %v8067 = vpop.f32.mrb[0].mxu0
  %8068 = vdwg.mxu0
  %v8069 = vadd.f32 %v7129, %v7911
  %v8070 = vadd.f32 %v7130, %v7914
  %v8071 = vadd.f32 %v7131, %v7919
  %v8072 = vadd.f32 %v7132, %v7922
  %v8073 = vadd.f32 %v7133, %v7927
  %v8074 = vadd.f32 %v7134, %v7930
  %v8075 = vadd.f32 %v7135, %v7935
  %v8076 = vadd.f32 %v7136, %v7938
  %v8077 = vadd.f32 %v7137, %v7943
  %v8078 = vadd.f32 %v7138, %v7946
  %v8079 = vadd.f32 %v7139, %v7951
  %v8080 = vadd.f32 %v7140, %v7954
  %v8081 = vadd.f32 %v7141, %v7959
  %v8082 = vadd.f32 %v7142, %v7962
  %v8083 = vadd.f32 %v7143, %v7967
  %v8084 = vadd.f32 %v7144, %v7970
  %v8085 = vadd.f32 %v7145, %v7975
  %v8086 = vadd.f32 %v7146, %v7978
  %v8087 = vadd.f32 %v7147, %v7983
  %v8088 = vadd.f32 %v7148, %v7986
  %v8089 = vadd.f32 %v7149, %v7991
  %v8090 = vadd.f32 %v7150, %v7994
  %v8091 = vadd.f32 %v7151, %v7999
  %v8092 = vadd.f32 %v7152, %v8002
  %v8093 = vadd.f32 %v7153, %v8007
  %v8094 = vadd.f32 %v7154, %v8010
  %v8095 = vadd.f32 %v7155, %v8015
  %v8096 = vadd.f32 %v7156, %v8018
  %v8097 = vadd.f32 %v7157, %v8023
  %v8098 = vadd.f32 %v7158, %v8026
  %v8099 = vadd.f32 %v7159, %v8031
  %v8100 = vadd.f32 %v7160, %v8034
  %v8101 = vadd.f32 %v7161, %v8039
  %v8102 = vadd.f32 %v7162, %v8042
  %v8103 = vadd.f32 %v7163, %v8047
  %v8104 = vadd.f32 %v7164, %v8050
  %v8105 = vadd.f32 %v7165, %v8055
  %v8106 = vadd.f32 %v7166, %v8058
  %v8107 = vadd.f32 %v7167, %v8063
  %v8108 = vadd.f32 %v7168, %v8066
  %v8109 = vld [vmem:[%s4] sm:$0x1]
  %v8111 = vlaneseq
  %v8112 = vshrl.u32 %v8111, 7
  %v8113 = vsub.s32 0, %v8112
  %v8114 = vrot.slane %v8109, %v8113
  %v8116 = vadd.f32 %v8069, %v8114
  %v8117 = vadd.f32 %v8070, %v8114
  %v8118 = vadd.f32 %v8071, %v8114
  %v8119 = vadd.f32 %v8072, %v8114
  %v8120 = vadd.f32 %v8073, %v8114
  %v8121 = vadd.f32 %v8074, %v8114
  %v8122 = vadd.f32 %v8075, %v8114
  %v8123 = vadd.f32 %v8076, %v8114
  %v8124 = vadd.f32 %v8077, %v8114
  %v8125 = vadd.f32 %v8078, %v8114
  %v8126 = vadd.f32 %v8079, %v8114
  %v8127 = vadd.f32 %v8080, %v8114
  %v8128 = vadd.f32 %v8081, %v8114
  %v8129 = vadd.f32 %v8082, %v8114
  %v8130 = vadd.f32 %v8083, %v8114
  %v8131 = vadd.f32 %v8084, %v8114
  %v8132 = vadd.f32 %v8085, %v8114
  %v8133 = vadd.f32 %v8086, %v8114
  %v8134 = vadd.f32 %v8087, %v8114
  %v8135 = vadd.f32 %v8088, %v8114
  %v8136 = vadd.f32 %v8089, %v8114
  %v8137 = vadd.f32 %v8090, %v8114
  %v8138 = vadd.f32 %v8091, %v8114
  %v8139 = vadd.f32 %v8092, %v8114
  %v8140 = vadd.f32 %v8093, %v8114
  %v8141 = vadd.f32 %v8094, %v8114
  %v8142 = vadd.f32 %v8095, %v8114
  %v8143 = vadd.f32 %v8096, %v8114
  %v8144 = vadd.f32 %v8097, %v8114
  %v8145 = vadd.f32 %v8098, %v8114
  %v8146 = vadd.f32 %v8099, %v8114
  %v8147 = vadd.f32 %v8100, %v8114
  %v8148 = vadd.f32 %v8101, %v8114
  %v8149 = vadd.f32 %v8102, %v8114
  %v8150 = vadd.f32 %v8103, %v8114
  %v8151 = vadd.f32 %v8104, %v8114
  %v8152 = vadd.f32 %v8105, %v8114
  %v8153 = vadd.f32 %v8106, %v8114
  %v8154 = vadd.f32 %v8107, %v8114
  %v8155 = vadd.f32 %v8108, %v8114
  %v8156 = vmax.f32 %v8116, 0.0
  %v8157 = vmax.f32 %v8117, 0.0
  %v8158 = vmax.f32 %v8118, 0.0
  %v8159 = vmax.f32 %v8119, 0.0
  %v8160 = vmax.f32 %v8120, 0.0
  %v8161 = vmax.f32 %v8121, 0.0
  %v8162 = vmax.f32 %v8122, 0.0
  %v8163 = vmax.f32 %v8123, 0.0
  %v8164 = vmax.f32 %v8124, 0.0
  %v8165 = vmax.f32 %v8125, 0.0
  %v8166 = vmax.f32 %v8126, 0.0
  %v8167 = vmax.f32 %v8127, 0.0
  %v8168 = vmax.f32 %v8128, 0.0
  %v8169 = vmax.f32 %v8129, 0.0
  %v8170 = vmax.f32 %v8130, 0.0
  %v8171 = vmax.f32 %v8131, 0.0
  %v8172 = vmax.f32 %v8132, 0.0
  %v8173 = vmax.f32 %v8133, 0.0
  %v8174 = vmax.f32 %v8134, 0.0
  %v8175 = vmax.f32 %v8135, 0.0
  %v8176 = vmax.f32 %v8136, 0.0
  %v8177 = vmax.f32 %v8137, 0.0
  %v8178 = vmax.f32 %v8138, 0.0
  %v8179 = vmax.f32 %v8139, 0.0
  %v8180 = vmax.f32 %v8140, 0.0
  %v8181 = vmax.f32 %v8141, 0.0
  %v8182 = vmax.f32 %v8142, 0.0
  %v8183 = vmax.f32 %v8143, 0.0
  %v8184 = vmax.f32 %v8144, 0.0
  %v8185 = vmax.f32 %v8145, 0.0
  %v8186 = vmax.f32 %v8146, 0.0
  %v8187 = vmax.f32 %v8147, 0.0
  %v8188 = vmax.f32 %v8148, 0.0
  %v8189 = vmax.f32 %v8149, 0.0
  %v8190 = vmax.f32 %v8150, 0.0
  %v8191 = vmax.f32 %v8151, 0.0
  %v8192 = vmax.f32 %v8152, 0.0
  %v8193 = vmax.f32 %v8153, 0.0
  %v8194 = vmax.f32 %v8154, 0.0
  %v8195 = vmax.f32 %v8155, 0.0
  %v8196 = vmax.f32 %v8156, %v8158
  %v8197 = vmax.f32 %v8157, %v8159
  %v8198 = vmax.f32 %v8160, %v8162
  %v8199 = vmax.f32 %v8161, %v8163
  %v8200 = vmax.f32 %v8164, %v8166
  %v8201 = vmax.f32 %v8165, %v8167
  %v8202 = vmax.f32 %v8168, %v8170
  %v8203 = vmax.f32 %v8169, %v8171
  %v8204 = vmax.f32 %v8172, %v8174
  %v8205 = vmax.f32 %v8173, %v8175
  %v8206 = vmax.f32 %v8176, %v8178
  %v8207 = vmax.f32 %v8177, %v8179
  %v8208 = vmax.f32 %v8180, %v8182
  %v8209 = vmax.f32 %v8181, %v8183
  %v8210 = vmax.f32 %v8184, %v8186
  %v8211 = vmax.f32 %v8185, %v8187
  %v8212 = vmax.f32 %v8188, %v8190
  %v8213 = vmax.f32 %v8189, %v8191
  %v8214 = vmax.f32 %v8192, %v8194
  %v8215 = vmax.f32 %v8193, %v8195
  %v8236 = vrot.slane %v8196, 1
  %v8237 = vrot.slane %v8197, 1
  %v8238 = vsel %vm2365, %v8236, %v8237
  %v8239 = vrot.slane %v8198, 1
  %v8240 = vrot.slane %v8199, 1
  %v8241 = vsel %vm2365, %v8239, %v8240
  %v8242 = vrot.slane %v8200, 1
  %v8243 = vrot.slane %v8201, 1
  %v8244 = vsel %vm2365, %v8242, %v8243
  %v8245 = vrot.slane %v8202, 1
  %v8246 = vrot.slane %v8203, 1
  %v8247 = vsel %vm2365, %v8245, %v8246
  %v8248 = vrot.slane %v8204, 1
  %v8249 = vrot.slane %v8205, 1
  %v8250 = vsel %vm2365, %v8248, %v8249
  %v8251 = vrot.slane %v8206, 1
  %v8252 = vrot.slane %v8207, 1
  %v8253 = vsel %vm2365, %v8251, %v8252
  %v8254 = vrot.slane %v8208, 1
  %v8255 = vrot.slane %v8209, 1
  %v8256 = vsel %vm2365, %v8254, %v8255
  %v8257 = vrot.slane %v8210, 1
  %v8258 = vrot.slane %v8211, 1
  %v8259 = vsel %vm2365, %v8257, %v8258
  %v8260 = vrot.slane %v8212, 1
  %v8261 = vrot.slane %v8213, 1
  %v8262 = vsel %vm2365, %v8260, %v8261
  %v8263 = vrot.slane %v8214, 1
  %v8264 = vrot.slane %v8215, 1
  %v8265 = vsel %vm2365, %v8263, %v8264
  %v8286 = vsel %vm2365, %v8237, 0.0
  %v8287 = vsel %vm2365, %v8240, 0.0
  %v8288 = vsel %vm2365, %v8243, 0.0
  %v8289 = vsel %vm2365, %v8246, 0.0
  %v8290 = vsel %vm2365, %v8249, 0.0
  %v8291 = vsel %vm2365, %v8252, 0.0
  %v8292 = vsel %vm2365, %v8255, 0.0
  %v8293 = vsel %vm2365, %v8258, 0.0
  %v8294 = vsel %vm2365, %v8261, 0.0
  %v8295 = vsel %vm2365, %v8264, 0.0
  %v8296 = vmax.f32 %v8196, %v8238
  %v8297 = vmax.f32 %v8197, %v8286
  %v8298 = vmax.f32 %v8198, %v8241
  %v8299 = vmax.f32 %v8199, %v8287
  %v8300 = vmax.f32 %v8200, %v8244
  %v8301 = vmax.f32 %v8201, %v8288
  %v8302 = vmax.f32 %v8202, %v8247
  %v8303 = vmax.f32 %v8203, %v8289
  %v8304 = vmax.f32 %v8204, %v8250
  %v8305 = vmax.f32 %v8205, %v8290
  %v8306 = vmax.f32 %v8206, %v8253
  %v8307 = vmax.f32 %v8207, %v8291
  %v8308 = vmax.f32 %v8208, %v8256
  %v8309 = vmax.f32 %v8209, %v8292
  %v8310 = vmax.f32 %v8210, %v8259
  %v8311 = vmax.f32 %v8211, %v8293
  %v8312 = vmax.f32 %v8212, %v8262
  %v8313 = vmax.f32 %v8213, %v8294
  %v8314 = vmax.f32 %v8214, %v8265
  %v8315 = vmax.f32 %v8215, %v8295
  %v8316 = vpack.c.bf16 %v8297, %v8296
  %v8317 = vpack.c.bf16 %v8299, %v8298
  %v8318 = vpack.c.bf16 %v8301, %v8300
  %v8319 = vpack.c.bf16 %v8303, %v8302
  %v8320 = vpack.c.bf16 %v8305, %v8304
  %v8321 = vpack.c.bf16 %v8307, %v8306
  %v8322 = vpack.c.bf16 %v8309, %v8308
  %v8323 = vpack.c.bf16 %v8311, %v8310
  %v8324 = vpack.c.bf16 %v8313, %v8312
  %v8325 = vpack.c.bf16 %v8315, %v8314
  %v8336 = vunpack.c.l.b16 %v8316
  %v8337 = vunpack.c.h.b16 %v8316
  %v8338 = vunpack.c.l.b16 %v8317
  %v8339 = vunpack.c.h.b16 %v8317
  %v8340 = vunpack.c.l.b16 %v8318
  %v8341 = vunpack.c.h.b16 %v8318
  %v8342 = vunpack.c.l.b16 %v8319
  %v8343 = vunpack.c.h.b16 %v8319
  %v8344 = vunpack.c.l.b16 %v8320
  %v8345 = vunpack.c.h.b16 %v8320
  %v8346 = vunpack.c.l.b16 %v8321
  %v8347 = vunpack.c.h.b16 %v8321
  %v8348 = vunpack.c.l.b16 %v8322
  %v8349 = vunpack.c.h.b16 %v8322
  %v8350 = vunpack.c.l.b16 %v8323
  %v8351 = vunpack.c.h.b16 %v8323
  %v8352 = vunpack.c.l.b16 %v8324
  %v8353 = vunpack.c.h.b16 %v8324
  %v8354 = vunpack.c.l.b16 %v8325
  %v8355 = vunpack.c.h.b16 %v8325
  %v8356 = vpack.c.b16 %v8336, %v8336
  %v8357 = vpack.c.b16 %v8337, %v8337
  %v8358 = vpack.c.b16 %v8338, %v8338
  %v8359 = vpack.c.b16 %v8339, %v8339
  %v8360 = vpack.c.b16 %v8340, %v8340
  %v8361 = vpack.c.b16 %v8341, %v8341
  %v8362 = vpack.c.b16 %v8342, %v8342
  %v8363 = vpack.c.b16 %v8343, %v8343
  %v8364 = vpack.c.b16 %v8344, %v8344
  %v8365 = vpack.c.b16 %v8345, %v8345
  %v8366 = vpack.c.b16 %v8346, %v8346
  %v8367 = vpack.c.b16 %v8347, %v8347
  %v8368 = vpack.c.b16 %v8348, %v8348
  %v8369 = vpack.c.b16 %v8349, %v8349
  %v8370 = vpack.c.b16 %v8350, %v8350
  %v8371 = vpack.c.b16 %v8351, %v8351
  %v8372 = vpack.c.b16 %v8352, %v8352
  %v8373 = vpack.c.b16 %v8353, %v8353
  %v8374 = vpack.c.b16 %v8354, %v8354
  %v8375 = vpack.c.b16 %v8355, %v8355
  %8396 = vst [vmem:[%s5] sm:$0xf] %v8356
  %8397 = vst [vmem:[%s5 + $0x4] sm:$0xf] %v8357
  %8398 = vst [vmem:[%s5 + $0x8] sm:$0xf] %v8358
  %8399 = vst [vmem:[%s5 + $0xc] sm:$0xf] %v8359
  %8400 = vst [vmem:[%s5 + $0x10] sm:$0xf] %v8360
  %8401 = vst [vmem:[%s5 + $0x14] sm:$0xf] %v8361
  %8402 = vst [vmem:[%s5 + $0x18] sm:$0xf] %v8362
  %8403 = vst [vmem:[%s5 + $0x1c] sm:$0xf] %v8363
  %8404 = vst [vmem:[%s5 + $0x20] sm:$0xf] %v8364
  %8405 = vst [vmem:[%s5 + $0x24] sm:$0xf] %v8365
  %8406 = vst [vmem:[%s5 + $0x28] sm:$0xf] %v8366
  %8407 = vst [vmem:[%s5 + $0x2c] sm:$0xf] %v8367
  %8408 = vst [vmem:[%s5 + $0x30] sm:$0xf] %v8368
  %8409 = vst [vmem:[%s5 + $0x34] sm:$0xf] %v8369
  %8410 = vst [vmem:[%s5 + $0x38] sm:$0xf] %v8370
  %8411 = vst [vmem:[%s5 + $0x3c] sm:$0xf] %v8371
  %8412 = vst [vmem:[%s5 + $0x40] sm:$0xf] %v8372
  %8413 = vst [vmem:[%s5 + $0x44] sm:$0xf] %v8373
  %8414 = vst [vmem:[%s5 + $0x48] sm:$0xf] %v8374
  %8415 = vst [vmem:[%s5 + $0x4c] sm:$0xf] %v8375
  // Predicated region
  $region22: #{convnet_forward.2} parent=0 // pred_check
    _
  $region23: #{convnet_forward.2} parent=0 // pred_check_branch
    %8417 = sbr.rel (0) target = $region25
  $region24: #{convnet_forward.2} parent=0 // pred_region
    _
  $region25: #{convnet_forward.2} parent=0 // pred_fallthru
    _
  // Predicated region
  $region26: #{convnet_forward.2} parent=0 // pred_check
    _
  $region27: #{convnet_forward.2} parent=0 // pred_check_branch
    %8419 = sbr.rel (0) target = $region29
  $region28: #{convnet_forward.2} parent=0 // pred_region
    _
  $region29: #{convnet_forward.2} parent=0 // pred_fallthru
    _

// kernel: convnet_forward.3
$region0: #{convnet_forward.3}
  #allocation0 [shape = 'u32[]', space=smem, size = 0x4, offset = 0x4, fixed_abs, tag = 'smem constant byte address 0x4 - core index']
  #allocation1 [shape = 'u32[144,128]{1,0:T(1,128)}', space=vmem, size = 0x12000, scoped, tag = 'internal scratch']
  %s0 = inlined_call_operand.vmem [shape: bf16[16,10240], index: 0, kind: input, shape index: {}]
  %s1 = inlined_call_operand.vmem [shape: bf16[10240,128], index: 1, kind: input, shape index: {}]
  %s2 = inlined_call_operand.vmem [shape: f32[1,128], index: 2, kind: input, shape index: {}]
  %s3 = inlined_call_operand.vmem [shape: bf16[128,128], index: 3, kind: input, shape index: {}]
  %s4 = inlined_call_operand.vmem [shape: f32[1,128], index: 4, kind: input, shape index: {}]
  %s5 = inlined_call_operand.vmem [shape: bf16[128,128], index: 5, kind: input, shape index: {}]
  %s6 = inlined_call_operand.vmem [shape: f32[1,128], index: 6, kind: input, shape index: {}]
  %s7 = inlined_call_operand.vmem [shape: f32[16,128], index: 7, kind: output, shape index: {}]
  %s8 = sld [smem:[#allocation0]]
  $region38: #{convnet_forward.3} parent=0
    _
  %s10 = ssub.s32 1, %s8
  %s11 = scalar_select 0, %s10, %s8
  // Predicated region
  $region2: #{convnet_forward.3} parent=0 // pred_check
    _
  $region3: #{convnet_forward.3} parent=0 // pred_check_branch
    %13 = sbr.rel (0) target = $region5
  $region4: #{convnet_forward.3} parent=0 // pred_region
    _
  $region5: #{convnet_forward.3} parent=0 // pred_fallthru
    _
  // Predicated region
  $region6: #{convnet_forward.3} parent=0 // pred_check
    _
  $region7: #{convnet_forward.3} parent=0 // pred_check_branch
    %15 = sbr.rel (0) target = $region9
  $region8: #{convnet_forward.3} parent=0 // pred_region
    _
  $region9: #{convnet_forward.3} parent=0 // pred_fallthru
    _
  // Predicated region
  $region10: #{convnet_forward.3} parent=0 // pred_check
    _
  $region11: #{convnet_forward.3} parent=0 // pred_check_branch
    %17 = sbr.rel (0) target = $region13
  $region12: #{convnet_forward.3} parent=0 // pred_region
    _
  $region13: #{convnet_forward.3} parent=0 // pred_fallthru
    _
  // Predicated region
  $region14: #{convnet_forward.3} parent=0 // pred_check
    _
  $region15: #{convnet_forward.3} parent=0 // pred_check_branch
    %19 = sbr.rel (0) target = $region17
  $region16: #{convnet_forward.3} parent=0 // pred_region
    _
  $region17: #{convnet_forward.3} parent=0 // pred_fallthru
    _
  // Predicated region
  $region18: #{convnet_forward.3} parent=0 // pred_check
    _
  $region19: #{convnet_forward.3} parent=0 // pred_check_branch
    %21 = sbr.rel (0) target = $region21
  $region20: #{convnet_forward.3} parent=0 // pred_region
    _
  $region21: #{convnet_forward.3} parent=0 // pred_fallthru
    _
  // Predicated region
  $region22: #{convnet_forward.3} parent=0 // pred_check
    _
  $region23: #{convnet_forward.3} parent=0 // pred_check_branch
    %23 = sbr.rel (0) target = $region25
  $region24: #{convnet_forward.3} parent=0 // pred_region
    _
  $region25: #{convnet_forward.3} parent=0 // pred_fallthru
    _
  // Predicated region
  $region26: #{convnet_forward.3} parent=0 // pred_check
    _
  $region27: #{convnet_forward.3} parent=0 // pred_check_branch
    %25 = sbr.rel (0) target = $region29
  $region28: #{convnet_forward.3} parent=0 // pred_region
    _
  $region29: #{convnet_forward.3} parent=0 // pred_fallthru
    _
  %v27 = vld [vmem:[%s0] sm:$0xff]
  %v28 = vld [vmem:[%s0 + $0x8] sm:$0xff]
  %v29 = vld [vmem:[%s0 + $0x10] sm:$0xff]
  %v30 = vld [vmem:[%s0 + $0x18] sm:$0xff]
  %v31 = vld [vmem:[%s0 + $0x20] sm:$0xff]
  %v32 = vld [vmem:[%s0 + $0x28] sm:$0xff]
  %v33 = vld [vmem:[%s0 + $0x30] sm:$0xff]
  %v34 = vld [vmem:[%s0 + $0x38] sm:$0xff]
  %v35 = vld [vmem:[%s0 + $0x40] sm:$0xff]
  %v36 = vld [vmem:[%s0 + $0x48] sm:$0xff]
  %v37 = vld [vmem:[%s0 + $0x50] sm:$0xff]
  %v38 = vld [vmem:[%s0 + $0x58] sm:$0xff]
  %v39 = vld [vmem:[%s0 + $0x60] sm:$0xff]
  %v40 = vld [vmem:[%s0 + $0x68] sm:$0xff]
  %v41 = vld [vmem:[%s0 + $0x70] sm:$0xff]
  %v42 = vld [vmem:[%s0 + $0x78] sm:$0xff]
  %v43 = vld [vmem:[%s0 + $0x80] sm:$0xff]
  %v44 = vld [vmem:[%s0 + $0x88] sm:$0xff]
  %v45 = vld [vmem:[%s0 + $0x90] sm:$0xff]
  %v46 = vld [vmem:[%s0 + $0x98] sm:$0xff]
  %v47 = vld [vmem:[%s0 + $0xa0] sm:$0xff]
  %v48 = vld [vmem:[%s0 + $0xa8] sm:$0xff]
  %v49 = vld [vmem:[%s0 + $0xb0] sm:$0xff]
  %v50 = vld [vmem:[%s0 + $0xb8] sm:$0xff]
  %v51 = vld [vmem:[%s0 + $0xc0] sm:$0xff]
  %v52 = vld [vmem:[%s0 + $0xc8] sm:$0xff]
  %v53 = vld [vmem:[%s0 + $0xd0] sm:$0xff]
  %v54 = vld [vmem:[%s0 + $0xd8] sm:$0xff]
  %v55 = vld [vmem:[%s0 + $0xe0] sm:$0xff]
  %v56 = vld [vmem:[%s0 + $0xe8] sm:$0xff]
  %v57 = vld [vmem:[%s0 + $0xf0] sm:$0xff]
  %v58 = vld [vmem:[%s0 + $0xf8] sm:$0xff]
  %v59 = vld [vmem:[%s0 + $0x100] sm:$0xff]
  %v60 = vld [vmem:[%s0 + $0x108] sm:$0xff]
  %v61 = vld [vmem:[%s0 + $0x110] sm:$0xff]
  %v62 = vld [vmem:[%s0 + $0x118] sm:$0xff]
  %v63 = vld [vmem:[%s0 + $0x120] sm:$0xff]
  %v64 = vld [vmem:[%s0 + $0x128] sm:$0xff]
  %v65 = vld [vmem:[%s0 + $0x130] sm:$0xff]
  %v66 = vld [vmem:[%s0 + $0x138] sm:$0xff]
  %v67 = vld [vmem:[%s0 + $0x140] sm:$0xff]
  %v68 = vld [vmem:[%s0 + $0x148] sm:$0xff]
  %v69 = vld [vmem:[%s0 + $0x150] sm:$0xff]
  %v70 = vld [vmem:[%s0 + $0x158] sm:$0xff]
  %v71 = vld [vmem:[%s0 + $0x160] sm:$0xff]
  %v72 = vld [vmem:[%s0 + $0x168] sm:$0xff]
  %v73 = vld [vmem:[%s0 + $0x170] sm:$0xff]
  %v74 = vld [vmem:[%s0 + $0x178] sm:$0xff]
  %v75 = vld [vmem:[%s0 + $0x180] sm:$0xff]
  %v76 = vld [vmem:[%s0 + $0x188] sm:$0xff]
  %v77 = vld [vmem:[%s0 + $0x190] sm:$0xff]
  %v78 = vld [vmem:[%s0 + $0x198] sm:$0xff]
  %v79 = vld [vmem:[%s0 + $0x1a0] sm:$0xff]
  %v80 = vld [vmem:[%s0 + $0x1a8] sm:$0xff]
  %v81 = vld [vmem:[%s0 + $0x1b0] sm:$0xff]
  %v82 = vld [vmem:[%s0 + $0x1b8] sm:$0xff]
  %v83 = vld [vmem:[%s0 + $0x1c0] sm:$0xff]
  %v84 = vld [vmem:[%s0 + $0x1c8] sm:$0xff]
  %v85 = vld [vmem:[%s0 + $0x1d0] sm:$0xff]
  %v86 = vld [vmem:[%s0 + $0x1d8] sm:$0xff]
  %v87 = vld [vmem:[%s0 + $0x1e0] sm:$0xff]
  %v88 = vld [vmem:[%s0 + $0x1e8] sm:$0xff]
  %v89 = vld [vmem:[%s0 + $0x1f0] sm:$0xff]
  %v90 = vld [vmem:[%s0 + $0x1f8] sm:$0xff]
  %v91 = vld [vmem:[%s0 + $0x200] sm:$0xff]
  %v92 = vld [vmem:[%s0 + $0x208] sm:$0xff]
  %v93 = vld [vmem:[%s0 + $0x210] sm:$0xff]
  %v94 = vld [vmem:[%s0 + $0x218] sm:$0xff]
  %v95 = vld [vmem:[%s0 + $0x220] sm:$0xff]
  %v96 = vld [vmem:[%s0 + $0x228] sm:$0xff]
  %v97 = vld [vmem:[%s0 + $0x230] sm:$0xff]
  %v98 = vld [vmem:[%s0 + $0x238] sm:$0xff]
  %v99 = vld [vmem:[%s0 + $0x240] sm:$0xff]
  %v100 = vld [vmem:[%s0 + $0x248] sm:$0xff]
  %v101 = vld [vmem:[%s0 + $0x250] sm:$0xff]
  %v102 = vld [vmem:[%s0 + $0x258] sm:$0xff]
  %v103 = vld [vmem:[%s0 + $0x260] sm:$0xff]
  %v104 = vld [vmem:[%s0 + $0x268] sm:$0xff]
  %v105 = vld [vmem:[%s0 + $0x270] sm:$0xff]
  %v106 = vld [vmem:[%s0 + $0x278] sm:$0xff]
  %v107 = vld [vmem:[%s1] sm:$0xf]
  %v108 = vld [vmem:[%s1 + $0x4] sm:$0xf]
  %v109 = vld [vmem:[%s1 + $0x8] sm:$0xf]
  %v110 = vld [vmem:[%s1 + $0xc] sm:$0xf]
  %v111 = vld [vmem:[%s1 + $0x10] sm:$0xf]
  %v112 = vld [vmem:[%s1 + $0x14] sm:$0xf]
  %v113 = vld [vmem:[%s1 + $0x18] sm:$0xf]
  %v114 = vld [vmem:[%s1 + $0x1c] sm:$0xf]
  %v115 = vld [vmem:[%s1 + $0x20] sm:$0xf]
  %v116 = vld [vmem:[%s1 + $0x24] sm:$0xf]
  %v117 = vld [vmem:[%s1 + $0x28] sm:$0xf]
  %v118 = vld [vmem:[%s1 + $0x2c] sm:$0xf]
  %v119 = vld [vmem:[%s1 + $0x30] sm:$0xf]
  %v120 = vld [vmem:[%s1 + $0x34] sm:$0xf]
  %v121 = vld [vmem:[%s1 + $0x38] sm:$0xf]
  %v122 = vld [vmem:[%s1 + $0x3c] sm:$0xf]
  %v123 = vld [vmem:[%s1 + $0x40] sm:$0xf]
  %v124 = vld [vmem:[%s1 + $0x44] sm:$0xf]
  %v125 = vld [vmem:[%s1 + $0x48] sm:$0xf]
  %v126 = vld [vmem:[%s1 + $0x4c] sm:$0xf]
  %v127 = vld [vmem:[%s1 + $0x50] sm:$0xf]
  %v128 = vld [vmem:[%s1 + $0x54] sm:$0xf]
  %v129 = vld [vmem:[%s1 + $0x58] sm:$0xf]
  %v130 = vld [vmem:[%s1 + $0x5c] sm:$0xf]
  %v131 = vld [vmem:[%s1 + $0x60] sm:$0xf]
  %v132 = vld [vmem:[%s1 + $0x64] sm:$0xf]
  %v133 = vld [vmem:[%s1 + $0x68] sm:$0xf]
  %v134 = vld [vmem:[%s1 + $0x6c] sm:$0xf]
  %v135 = vld [vmem:[%s1 + $0x70] sm:$0xf]
  %v136 = vld [vmem:[%s1 + $0x74] sm:$0xf]
  %v137 = vld [vmem:[%s1 + $0x78] sm:$0xf]
  %v138 = vld [vmem:[%s1 + $0x7c] sm:$0xf]
  %v139 = vld [vmem:[%s1 + $0x80] sm:$0xf]
  %v140 = vld [vmem:[%s1 + $0x84] sm:$0xf]
  %v141 = vld [vmem:[%s1 + $0x88] sm:$0xf]
  %v142 = vld [vmem:[%s1 + $0x8c] sm:$0xf]
  %v143 = vld [vmem:[%s1 + $0x90] sm:$0xf]
  %v144 = vld [vmem:[%s1 + $0x94] sm:$0xf]
  %v145 = vld [vmem:[%s1 + $0x98] sm:$0xf]
  %v146 = vld [vmem:[%s1 + $0x9c] sm:$0xf]
  %v147 = vld [vmem:[%s1 + $0xa0] sm:$0xf]
  %v148 = vld [vmem:[%s1 + $0xa4] sm:$0xf]
  %v149 = vld [vmem:[%s1 + $0xa8] sm:$0xf]
  %v150 = vld [vmem:[%s1 + $0xac] sm:$0xf]
  %v151 = vld [vmem:[%s1 + $0xb0] sm:$0xf]
  %v152 = vld [vmem:[%s1 + $0xb4] sm:$0xf]
  %v153 = vld [vmem:[%s1 + $0xb8] sm:$0xf]
  %v154 = vld [vmem:[%s1 + $0xbc] sm:$0xf]
  %v155 = vld [vmem:[%s1 + $0xc0] sm:$0xf]
  %v156 = vld [vmem:[%s1 + $0xc4] sm:$0xf]
  %v157 = vld [vmem:[%s1 + $0xc8] sm:$0xf]
  %v158 = vld [vmem:[%s1 + $0xcc] sm:$0xf]
  %v159 = vld [vmem:[%s1 + $0xd0] sm:$0xf]
  %v160 = vld [vmem:[%s1 + $0xd4] sm:$0xf]
  %v161 = vld [vmem:[%s1 + $0xd8] sm:$0xf]
  %v162 = vld [vmem:[%s1 + $0xdc] sm:$0xf]
  %v163 = vld [vmem:[%s1 + $0xe0] sm:$0xf]
  %v164 = vld [vmem:[%s1 + $0xe4] sm:$0xf]
  %v165 = vld [vmem:[%s1 + $0xe8] sm:$0xf]
  %v166 = vld [vmem:[%s1 + $0xec] sm:$0xf]
  %v167 = vld [vmem:[%s1 + $0xf0] sm:$0xf]
  %v168 = vld [vmem:[%s1 + $0xf4] sm:$0xf]
  %v169 = vld [vmem:[%s1 + $0xf8] sm:$0xf]
  %v170 = vld [vmem:[%s1 + $0xfc] sm:$0xf]
  %v171 = vld [vmem:[%s1 + $0x100] sm:$0xf]
  %v172 = vld [vmem:[%s1 + $0x104] sm:$0xf]
  %v173 = vld [vmem:[%s1 + $0x108] sm:$0xf]
  %v174 = vld [vmem:[%s1 + $0x10c] sm:$0xf]
  %v175 = vld [vmem:[%s1 + $0x110] sm:$0xf]
  %v176 = vld [vmem:[%s1 + $0x114] sm:$0xf]
  %v177 = vld [vmem:[%s1 + $0x118] sm:$0xf]
  %v178 = vld [vmem:[%s1 + $0x11c] sm:$0xf]
  %v179 = vld [vmem:[%s1 + $0x120] sm:$0xf]
  %v180 = vld [vmem:[%s1 + $0x124] sm:$0xf]
  %v181 = vld [vmem:[%s1 + $0x128] sm:$0xf]
  %v182 = vld [vmem:[%s1 + $0x12c] sm:$0xf]
  %v183 = vld [vmem:[%s1 + $0x130] sm:$0xf]
  %v184 = vld [vmem:[%s1 + $0x134] sm:$0xf]
  %v185 = vld [vmem:[%s1 + $0x138] sm:$0xf]
  %v186 = vld [vmem:[%s1 + $0x13c] sm:$0xf]
  %v187 = vld [vmem:[%s1 + $0x140] sm:$0xf]
  %v188 = vld [vmem:[%s1 + $0x144] sm:$0xf]
  %v189 = vld [vmem:[%s1 + $0x148] sm:$0xf]
  %v190 = vld [vmem:[%s1 + $0x14c] sm:$0xf]
  %v191 = vld [vmem:[%s1 + $0x150] sm:$0xf]
  %v192 = vld [vmem:[%s1 + $0x154] sm:$0xf]
  %v193 = vld [vmem:[%s1 + $0x158] sm:$0xf]
  %v194 = vld [vmem:[%s1 + $0x15c] sm:$0xf]
  %v195 = vld [vmem:[%s1 + $0x160] sm:$0xf]
  %v196 = vld [vmem:[%s1 + $0x164] sm:$0xf]
  %v197 = vld [vmem:[%s1 + $0x168] sm:$0xf]
  %v198 = vld [vmem:[%s1 + $0x16c] sm:$0xf]
  %v199 = vld [vmem:[%s1 + $0x170] sm:$0xf]
  %v200 = vld [vmem:[%s1 + $0x174] sm:$0xf]
  %v201 = vld [vmem:[%s1 + $0x178] sm:$0xf]
  %v202 = vld [vmem:[%s1 + $0x17c] sm:$0xf]
  %v203 = vld [vmem:[%s1 + $0x180] sm:$0xf]
  %v204 = vld [vmem:[%s1 + $0x184] sm:$0xf]
  %v205 = vld [vmem:[%s1 + $0x188] sm:$0xf]
  %v206 = vld [vmem:[%s1 + $0x18c] sm:$0xf]
  %v207 = vld [vmem:[%s1 + $0x190] sm:$0xf]
  %v208 = vld [vmem:[%s1 + $0x194] sm:$0xf]
  %v209 = vld [vmem:[%s1 + $0x198] sm:$0xf]
  %v210 = vld [vmem:[%s1 + $0x19c] sm:$0xf]
  %v211 = vld [vmem:[%s1 + $0x1a0] sm:$0xf]
  %v212 = vld [vmem:[%s1 + $0x1a4] sm:$0xf]
  %v213 = vld [vmem:[%s1 + $0x1a8] sm:$0xf]
  %v214 = vld [vmem:[%s1 + $0x1ac] sm:$0xf]
  %v215 = vld [vmem:[%s1 + $0x1b0] sm:$0xf]
  %v216 = vld [vmem:[%s1 + $0x1b4] sm:$0xf]
  %v217 = vld [vmem:[%s1 + $0x1b8] sm:$0xf]
  %v218 = vld [vmem:[%s1 + $0x1bc] sm:$0xf]
  %v219 = vld [vmem:[%s1 + $0x1c0] sm:$0xf]
  %v220 = vld [vmem:[%s1 + $0x1c4] sm:$0xf]
  %v221 = vld [vmem:[%s1 + $0x1c8] sm:$0xf]
  %v222 = vld [vmem:[%s1 + $0x1cc] sm:$0xf]
  %v223 = vld [vmem:[%s1 + $0x1d0] sm:$0xf]
  %v224 = vld [vmem:[%s1 + $0x1d4] sm:$0xf]
  %v225 = vld [vmem:[%s1 + $0x1d8] sm:$0xf]
  %v226 = vld [vmem:[%s1 + $0x1dc] sm:$0xf]
  %v227 = vld [vmem:[%s1 + $0x1e0] sm:$0xf]
  %v228 = vld [vmem:[%s1 + $0x1e4] sm:$0xf]
  %v229 = vld [vmem:[%s1 + $0x1e8] sm:$0xf]
  %v230 = vld [vmem:[%s1 + $0x1ec] sm:$0xf]
  %v231 = vld [vmem:[%s1 + $0x1f0] sm:$0xf]
  %v232 = vld [vmem:[%s1 + $0x1f4] sm:$0xf]
  %v233 = vld [vmem:[%s1 + $0x1f8] sm:$0xf]
  %v234 = vld [vmem:[%s1 + $0x1fc] sm:$0xf]
  %v235 = vld [vmem:[%s1 + $0x200] sm:$0xf]
  %v236 = vld [vmem:[%s1 + $0x204] sm:$0xf]
  %v237 = vld [vmem:[%s1 + $0x208] sm:$0xf]
  %v238 = vld [vmem:[%s1 + $0x20c] sm:$0xf]
  %v239 = vld [vmem:[%s1 + $0x210] sm:$0xf]
  %v240 = vld [vmem:[%s1 + $0x214] sm:$0xf]
  %v241 = vld [vmem:[%s1 + $0x218] sm:$0xf]
  %v242 = vld [vmem:[%s1 + $0x21c] sm:$0xf]
  %v243 = vld [vmem:[%s1 + $0x220] sm:$0xf]
  %v244 = vld [vmem:[%s1 + $0x224] sm:$0xf]
  %v245 = vld [vmem:[%s1 + $0x228] sm:$0xf]
  %v246 = vld [vmem:[%s1 + $0x22c] sm:$0xf]
  %v247 = vld [vmem:[%s1 + $0x230] sm:$0xf]
  %v248 = vld [vmem:[%s1 + $0x234] sm:$0xf]
  %v249 = vld [vmem:[%s1 + $0x238] sm:$0xf]
  %v250 = vld [vmem:[%s1 + $0x23c] sm:$0xf]
  %v251 = vld [vmem:[%s1 + $0x240] sm:$0xf]
  %v252 = vld [vmem:[%s1 + $0x244] sm:$0xf]
  %v253 = vld [vmem:[%s1 + $0x248] sm:$0xf]
  %v254 = vld [vmem:[%s1 + $0x24c] sm:$0xf]
  %v255 = vld [vmem:[%s1 + $0x250] sm:$0xf]
  %v256 = vld [vmem:[%s1 + $0x254] sm:$0xf]
  %v257 = vld [vmem:[%s1 + $0x258] sm:$0xf]
  %v258 = vld [vmem:[%s1 + $0x25c] sm:$0xf]
  %v259 = vld [vmem:[%s1 + $0x260] sm:$0xf]
  %v260 = vld [vmem:[%s1 + $0x264] sm:$0xf]
  %v261 = vld [vmem:[%s1 + $0x268] sm:$0xf]
  %v262 = vld [vmem:[%s1 + $0x26c] sm:$0xf]
  %v263 = vld [vmem:[%s1 + $0x270] sm:$0xf]
  %v264 = vld [vmem:[%s1 + $0x274] sm:$0xf]
  %v265 = vld [vmem:[%s1 + $0x278] sm:$0xf]
  %v266 = vld [vmem:[%s1 + $0x27c] sm:$0xf]
  %v267 = vld [vmem:[%s1 + $0x280] sm:$0xf]
  %v268 = vld [vmem:[%s1 + $0x284] sm:$0xf]
  %v269 = vld [vmem:[%s1 + $0x288] sm:$0xf]
  %v270 = vld [vmem:[%s1 + $0x28c] sm:$0xf]
  %v271 = vld [vmem:[%s1 + $0x290] sm:$0xf]
  %v272 = vld [vmem:[%s1 + $0x294] sm:$0xf]
  %v273 = vld [vmem:[%s1 + $0x298] sm:$0xf]
  %v274 = vld [vmem:[%s1 + $0x29c] sm:$0xf]
  %v275 = vld [vmem:[%s1 + $0x2a0] sm:$0xf]
  %v276 = vld [vmem:[%s1 + $0x2a4] sm:$0xf]
  %v277 = vld [vmem:[%s1 + $0x2a8] sm:$0xf]
  %v278 = vld [vmem:[%s1 + $0x2ac] sm:$0xf]
  %v279 = vld [vmem:[%s1 + $0x2b0] sm:$0xf]
  %v280 = vld [vmem:[%s1 + $0x2b4] sm:$0xf]
  %v281 = vld [vmem:[%s1 + $0x2b8] sm:$0xf]
  %v282 = vld [vmem:[%s1 + $0x2bc] sm:$0xf]
  %v283 = vld [vmem:[%s1 + $0x2c0] sm:$0xf]
  %v284 = vld [vmem:[%s1 + $0x2c4] sm:$0xf]
  %v285 = vld [vmem:[%s1 + $0x2c8] sm:$0xf]
  %v286 = vld [vmem:[%s1 + $0x2cc] sm:$0xf]
  %v287 = vld [vmem:[%s1 + $0x2d0] sm:$0xf]
  %v288 = vld [vmem:[%s1 + $0x2d4] sm:$0xf]
  %v289 = vld [vmem:[%s1 + $0x2d8] sm:$0xf]
  %v290 = vld [vmem:[%s1 + $0x2dc] sm:$0xf]
  %v291 = vld [vmem:[%s1 + $0x2e0] sm:$0xf]
  %v292 = vld [vmem:[%s1 + $0x2e4] sm:$0xf]
  %v293 = vld [vmem:[%s1 + $0x2e8] sm:$0xf]
  %v294 = vld [vmem:[%s1 + $0x2ec] sm:$0xf]
  %v295 = vld [vmem:[%s1 + $0x2f0] sm:$0xf]
  %v296 = vld [vmem:[%s1 + $0x2f4] sm:$0xf]
  %v297 = vld [vmem:[%s1 + $0x2f8] sm:$0xf]
  %v298 = vld [vmem:[%s1 + $0x2fc] sm:$0xf]
  %v299 = vld [vmem:[%s1 + $0x300] sm:$0xf]
  %v300 = vld [vmem:[%s1 + $0x304] sm:$0xf]
  %v301 = vld [vmem:[%s1 + $0x308] sm:$0xf]
  %v302 = vld [vmem:[%s1 + $0x30c] sm:$0xf]
  %v303 = vld [vmem:[%s1 + $0x310] sm:$0xf]
  %v304 = vld [vmem:[%s1 + $0x314] sm:$0xf]
  %v305 = vld [vmem:[%s1 + $0x318] sm:$0xf]
  %v306 = vld [vmem:[%s1 + $0x31c] sm:$0xf]
  %v307 = vld [vmem:[%s1 + $0x320] sm:$0xf]
  %v308 = vld [vmem:[%s1 + $0x324] sm:$0xf]
  %v309 = vld [vmem:[%s1 + $0x328] sm:$0xf]
  %v310 = vld [vmem:[%s1 + $0x32c] sm:$0xf]
  %v311 = vld [vmem:[%s1 + $0x330] sm:$0xf]
  %v312 = vld [vmem:[%s1 + $0x334] sm:$0xf]
  %v313 = vld [vmem:[%s1 + $0x338] sm:$0xf]
  %v314 = vld [vmem:[%s1 + $0x33c] sm:$0xf]
  %v315 = vld [vmem:[%s1 + $0x340] sm:$0xf]
  %v316 = vld [vmem:[%s1 + $0x344] sm:$0xf]
  %v317 = vld [vmem:[%s1 + $0x348] sm:$0xf]
  %v318 = vld [vmem:[%s1 + $0x34c] sm:$0xf]
  %v319 = vld [vmem:[%s1 + $0x350] sm:$0xf]
  %v320 = vld [vmem:[%s1 + $0x354] sm:$0xf]
  %v321 = vld [vmem:[%s1 + $0x358] sm:$0xf]
  %v322 = vld [vmem:[%s1 + $0x35c] sm:$0xf]
  %v323 = vld [vmem:[%s1 + $0x360] sm:$0xf]
  %v324 = vld [vmem:[%s1 + $0x364] sm:$0xf]
  %v325 = vld [vmem:[%s1 + $0x368] sm:$0xf]
  %v326 = vld [vmem:[%s1 + $0x36c] sm:$0xf]
  %v327 = vld [vmem:[%s1 + $0x370] sm:$0xf]
  %v328 = vld [vmem:[%s1 + $0x374] sm:$0xf]
  %v329 = vld [vmem:[%s1 + $0x378] sm:$0xf]
  %v330 = vld [vmem:[%s1 + $0x37c] sm:$0xf]
  %v331 = vld [vmem:[%s1 + $0x380] sm:$0xf]
  %v332 = vld [vmem:[%s1 + $0x384] sm:$0xf]
  %v333 = vld [vmem:[%s1 + $0x388] sm:$0xf]
  %v334 = vld [vmem:[%s1 + $0x38c] sm:$0xf]
  %v335 = vld [vmem:[%s1 + $0x390] sm:$0xf]
  %v336 = vld [vmem:[%s1 + $0x394] sm:$0xf]
  %v337 = vld [vmem:[%s1 + $0x398] sm:$0xf]
  %v338 = vld [vmem:[%s1 + $0x39c] sm:$0xf]
  %v339 = vld [vmem:[%s1 + $0x3a0] sm:$0xf]
  %v340 = vld [vmem:[%s1 + $0x3a4] sm:$0xf]
  %v341 = vld [vmem:[%s1 + $0x3a8] sm:$0xf]
  %v342 = vld [vmem:[%s1 + $0x3ac] sm:$0xf]
  %v343 = vld [vmem:[%s1 + $0x3b0] sm:$0xf]
  %v344 = vld [vmem:[%s1 + $0x3b4] sm:$0xf]
  %v345 = vld [vmem:[%s1 + $0x3b8] sm:$0xf]
  %v346 = vld [vmem:[%s1 + $0x3bc] sm:$0xf]
  %v347 = vld [vmem:[%s1 + $0x3c0] sm:$0xf]
  %v348 = vld [vmem:[%s1 + $0x3c4] sm:$0xf]
  %v349 = vld [vmem:[%s1 + $0x3c8] sm:$0xf]
  %v350 = vld [vmem:[%s1 + $0x3cc] sm:$0xf]
  %v351 = vld [vmem:[%s1 + $0x3d0] sm:$0xf]
  %v352 = vld [vmem:[%s1 + $0x3d4] sm:$0xf]
  %v353 = vld [vmem:[%s1 + $0x3d8] sm:$0xf]
  %v354 = vld [vmem:[%s1 + $0x3dc] sm:$0xf]
  %v355 = vld [vmem:[%s1 + $0x3e0] sm:$0xf]
  %v356 = vld [vmem:[%s1 + $0x3e4] sm:$0xf]
  %v357 = vld [vmem:[%s1 + $0x3e8] sm:$0xf]
  %v358 = vld [vmem:[%s1 + $0x3ec] sm:$0xf]
  %v359 = vld [vmem:[%s1 + $0x3f0] sm:$0xf]
  %v360 = vld [vmem:[%s1 + $0x3f4] sm:$0xf]
  %v361 = vld [vmem:[%s1 + $0x3f8] sm:$0xf]
  %v362 = vld [vmem:[%s1 + $0x3fc] sm:$0xf]
  %v363 = vld [vmem:[%s1 + $0x400] sm:$0xf]
  %v364 = vld [vmem:[%s1 + $0x404] sm:$0xf]
  %v365 = vld [vmem:[%s1 + $0x408] sm:$0xf]
  %v366 = vld [vmem:[%s1 + $0x40c] sm:$0xf]
  %v367 = vld [vmem:[%s1 + $0x410] sm:$0xf]
  %v368 = vld [vmem:[%s1 + $0x414] sm:$0xf]
  %v369 = vld [vmem:[%s1 + $0x418] sm:$0xf]
  %v370 = vld [vmem:[%s1 + $0x41c] sm:$0xf]
  %v371 = vld [vmem:[%s1 + $0x420] sm:$0xf]
  %v372 = vld [vmem:[%s1 + $0x424] sm:$0xf]
  %v373 = vld [vmem:[%s1 + $0x428] sm:$0xf]
  %v374 = vld [vmem:[%s1 + $0x42c] sm:$0xf]
  %v375 = vld [vmem:[%s1 + $0x430] sm:$0xf]
  %v376 = vld [vmem:[%s1 + $0x434] sm:$0xf]
  %v377 = vld [vmem:[%s1 + $0x438] sm:$0xf]
  %v378 = vld [vmem:[%s1 + $0x43c] sm:$0xf]
  %v379 = vld [vmem:[%s1 + $0x440] sm:$0xf]
  %v380 = vld [vmem:[%s1 + $0x444] sm:$0xf]
  %v381 = vld [vmem:[%s1 + $0x448] sm:$0xf]
  %v382 = vld [vmem:[%s1 + $0x44c] sm:$0xf]
  %v383 = vld [vmem:[%s1 + $0x450] sm:$0xf]
  %v384 = vld [vmem:[%s1 + $0x454] sm:$0xf]
  %v385 = vld [vmem:[%s1 + $0x458] sm:$0xf]
  %v386 = vld [vmem:[%s1 + $0x45c] sm:$0xf]
  %v387 = vld [vmem:[%s1 + $0x460] sm:$0xf]
  %v388 = vld [vmem:[%s1 + $0x464] sm:$0xf]
  %v389 = vld [vmem:[%s1 + $0x468] sm:$0xf]
  %v390 = vld [vmem:[%s1 + $0x46c] sm:$0xf]
  %v391 = vld [vmem:[%s1 + $0x470] sm:$0xf]
  %v392 = vld [vmem:[%s1 + $0x474] sm:$0xf]
  %v393 = vld [vmem:[%s1 + $0x478] sm:$0xf]
  %v394 = vld [vmem:[%s1 + $0x47c] sm:$0xf]
  %v395 = vld [vmem:[%s1 + $0x480] sm:$0xf]
  %v396 = vld [vmem:[%s1 + $0x484] sm:$0xf]
  %v397 = vld [vmem:[%s1 + $0x488] sm:$0xf]
  %v398 = vld [vmem:[%s1 + $0x48c] sm:$0xf]
  %v399 = vld [vmem:[%s1 + $0x490] sm:$0xf]
  %v400 = vld [vmem:[%s1 + $0x494] sm:$0xf]
  %v401 = vld [vmem:[%s1 + $0x498] sm:$0xf]
  %v402 = vld [vmem:[%s1 + $0x49c] sm:$0xf]
  %v403 = vld [vmem:[%s1 + $0x4a0] sm:$0xf]
  %v404 = vld [vmem:[%s1 + $0x4a4] sm:$0xf]
  %v405 = vld [vmem:[%s1 + $0x4a8] sm:$0xf]
  %v406 = vld [vmem:[%s1 + $0x4ac] sm:$0xf]
  %v407 = vld [vmem:[%s1 + $0x4b0] sm:$0xf]
  %v408 = vld [vmem:[%s1 + $0x4b4] sm:$0xf]
  %v409 = vld [vmem:[%s1 + $0x4b8] sm:$0xf]
  %v410 = vld [vmem:[%s1 + $0x4bc] sm:$0xf]
  %v411 = vld [vmem:[%s1 + $0x4c0] sm:$0xf]
  %v412 = vld [vmem:[%s1 + $0x4c4] sm:$0xf]
  %v413 = vld [vmem:[%s1 + $0x4c8] sm:$0xf]
  %v414 = vld [vmem:[%s1 + $0x4cc] sm:$0xf]
  %v415 = vld [vmem:[%s1 + $0x4d0] sm:$0xf]
  %v416 = vld [vmem:[%s1 + $0x4d4] sm:$0xf]
  %v417 = vld [vmem:[%s1 + $0x4d8] sm:$0xf]
  %v418 = vld [vmem:[%s1 + $0x4dc] sm:$0xf]
  %v419 = vld [vmem:[%s1 + $0x4e0] sm:$0xf]
  %v420 = vld [vmem:[%s1 + $0x4e4] sm:$0xf]
  %v421 = vld [vmem:[%s1 + $0x4e8] sm:$0xf]
  %v422 = vld [vmem:[%s1 + $0x4ec] sm:$0xf]
  %v423 = vld [vmem:[%s1 + $0x4f0] sm:$0xf]
  %v424 = vld [vmem:[%s1 + $0x4f4] sm:$0xf]
  %v425 = vld [vmem:[%s1 + $0x4f8] sm:$0xf]
  %v426 = vld [vmem:[%s1 + $0x4fc] sm:$0xf]
  %v427 = vld [vmem:[%s1 + $0x500] sm:$0xf]
  %v428 = vld [vmem:[%s1 + $0x504] sm:$0xf]
  %v429 = vld [vmem:[%s1 + $0x508] sm:$0xf]
  %v430 = vld [vmem:[%s1 + $0x50c] sm:$0xf]
  %v431 = vld [vmem:[%s1 + $0x510] sm:$0xf]
  %v432 = vld [vmem:[%s1 + $0x514] sm:$0xf]
  %v433 = vld [vmem:[%s1 + $0x518] sm:$0xf]
  %v434 = vld [vmem:[%s1 + $0x51c] sm:$0xf]
  %v435 = vld [vmem:[%s1 + $0x520] sm:$0xf]
  %v436 = vld [vmem:[%s1 + $0x524] sm:$0xf]
  %v437 = vld [vmem:[%s1 + $0x528] sm:$0xf]
  %v438 = vld [vmem:[%s1 + $0x52c] sm:$0xf]
  %v439 = vld [vmem:[%s1 + $0x530] sm:$0xf]
  %v440 = vld [vmem:[%s1 + $0x534] sm:$0xf]
  %v441 = vld [vmem:[%s1 + $0x538] sm:$0xf]
  %v442 = vld [vmem:[%s1 + $0x53c] sm:$0xf]
  %v443 = vld [vmem:[%s1 + $0x540] sm:$0xf]
  %v444 = vld [vmem:[%s1 + $0x544] sm:$0xf]
  %v445 = vld [vmem:[%s1 + $0x548] sm:$0xf]
  %v446 = vld [vmem:[%s1 + $0x54c] sm:$0xf]
  %v447 = vld [vmem:[%s1 + $0x550] sm:$0xf]
  %v448 = vld [vmem:[%s1 + $0x554] sm:$0xf]
  %v449 = vld [vmem:[%s1 + $0x558] sm:$0xf]
  %v450 = vld [vmem:[%s1 + $0x55c] sm:$0xf]
  %v451 = vld [vmem:[%s1 + $0x560] sm:$0xf]
  %v452 = vld [vmem:[%s1 + $0x564] sm:$0xf]
  %v453 = vld [vmem:[%s1 + $0x568] sm:$0xf]
  %v454 = vld [vmem:[%s1 + $0x56c] sm:$0xf]
  %v455 = vld [vmem:[%s1 + $0x570] sm:$0xf]
  %v456 = vld [vmem:[%s1 + $0x574] sm:$0xf]
  %v457 = vld [vmem:[%s1 + $0x578] sm:$0xf]
  %v458 = vld [vmem:[%s1 + $0x57c] sm:$0xf]
  %v459 = vld [vmem:[%s1 + $0x580] sm:$0xf]
  %v460 = vld [vmem:[%s1 + $0x584] sm:$0xf]
  %v461 = vld [vmem:[%s1 + $0x588] sm:$0xf]
  %v462 = vld [vmem:[%s1 + $0x58c] sm:$0xf]
  %v463 = vld [vmem:[%s1 + $0x590] sm:$0xf]
  %v464 = vld [vmem:[%s1 + $0x594] sm:$0xf]
  %v465 = vld [vmem:[%s1 + $0x598] sm:$0xf]
  %v466 = vld [vmem:[%s1 + $0x59c] sm:$0xf]
  %v467 = vld [vmem:[%s1 + $0x5a0] sm:$0xf]
  %v468 = vld [vmem:[%s1 + $0x5a4] sm:$0xf]
  %v469 = vld [vmem:[%s1 + $0x5a8] sm:$0xf]
  %v470 = vld [vmem:[%s1 + $0x5ac] sm:$0xf]
  %v471 = vld [vmem:[%s1 + $0x5b0] sm:$0xf]
  %v472 = vld [vmem:[%s1 + $0x5b4] sm:$0xf]
  %v473 = vld [vmem:[%s1 + $0x5b8] sm:$0xf]
  %v474 = vld [vmem:[%s1 + $0x5bc] sm:$0xf]
  %v475 = vld [vmem:[%s1 + $0x5c0] sm:$0xf]
  %v476 = vld [vmem:[%s1 + $0x5c4] sm:$0xf]
  %v477 = vld [vmem:[%s1 + $0x5c8] sm:$0xf]
  %v478 = vld [vmem:[%s1 + $0x5cc] sm:$0xf]
  %v479 = vld [vmem:[%s1 + $0x5d0] sm:$0xf]
  %v480 = vld [vmem:[%s1 + $0x5d4] sm:$0xf]
  %v481 = vld [vmem:[%s1 + $0x5d8] sm:$0xf]
  %v482 = vld [vmem:[%s1 + $0x5dc] sm:$0xf]
  %v483 = vld [vmem:[%s1 + $0x5e0] sm:$0xf]
  %v484 = vld [vmem:[%s1 + $0x5e4] sm:$0xf]
  %v485 = vld [vmem:[%s1 + $0x5e8] sm:$0xf]
  %v486 = vld [vmem:[%s1 + $0x5ec] sm:$0xf]
  %v487 = vld [vmem:[%s1 + $0x5f0] sm:$0xf]
  %v488 = vld [vmem:[%s1 + $0x5f4] sm:$0xf]
  %v489 = vld [vmem:[%s1 + $0x5f8] sm:$0xf]
  %v490 = vld [vmem:[%s1 + $0x5fc] sm:$0xf]
  %v491 = vld [vmem:[%s1 + $0x600] sm:$0xf]
  %v492 = vld [vmem:[%s1 + $0x604] sm:$0xf]
  %v493 = vld [vmem:[%s1 + $0x608] sm:$0xf]
  %v494 = vld [vmem:[%s1 + $0x60c] sm:$0xf]
  %v495 = vld [vmem:[%s1 + $0x610] sm:$0xf]
  %v496 = vld [vmem:[%s1 + $0x614] sm:$0xf]
  %v497 = vld [vmem:[%s1 + $0x618] sm:$0xf]
  %v498 = vld [vmem:[%s1 + $0x61c] sm:$0xf]
  %v499 = vld [vmem:[%s1 + $0x620] sm:$0xf]
  %v500 = vld [vmem:[%s1 + $0x624] sm:$0xf]
  %v501 = vld [vmem:[%s1 + $0x628] sm:$0xf]
  %v502 = vld [vmem:[%s1 + $0x62c] sm:$0xf]
  %v503 = vld [vmem:[%s1 + $0x630] sm:$0xf]
  %v504 = vld [vmem:[%s1 + $0x634] sm:$0xf]
  %v505 = vld [vmem:[%s1 + $0x638] sm:$0xf]
  %v506 = vld [vmem:[%s1 + $0x63c] sm:$0xf]
  %v507 = vld [vmem:[%s1 + $0x640] sm:$0xf]
  %v508 = vld [vmem:[%s1 + $0x644] sm:$0xf]
  %v509 = vld [vmem:[%s1 + $0x648] sm:$0xf]
  %v510 = vld [vmem:[%s1 + $0x64c] sm:$0xf]
  %v511 = vld [vmem:[%s1 + $0x650] sm:$0xf]
  %v512 = vld [vmem:[%s1 + $0x654] sm:$0xf]
  %v513 = vld [vmem:[%s1 + $0x658] sm:$0xf]
  %v514 = vld [vmem:[%s1 + $0x65c] sm:$0xf]
  %v515 = vld [vmem:[%s1 + $0x660] sm:$0xf]
  %v516 = vld [vmem:[%s1 + $0x664] sm:$0xf]
  %v517 = vld [vmem:[%s1 + $0x668] sm:$0xf]
  %v518 = vld [vmem:[%s1 + $0x66c] sm:$0xf]
  %v519 = vld [vmem:[%s1 + $0x670] sm:$0xf]
  %v520 = vld [vmem:[%s1 + $0x674] sm:$0xf]
  %v521 = vld [vmem:[%s1 + $0x678] sm:$0xf]
  %v522 = vld [vmem:[%s1 + $0x67c] sm:$0xf]
  %v523 = vld [vmem:[%s1 + $0x680] sm:$0xf]
  %v524 = vld [vmem:[%s1 + $0x684] sm:$0xf]
  %v525 = vld [vmem:[%s1 + $0x688] sm:$0xf]
  %v526 = vld [vmem:[%s1 + $0x68c] sm:$0xf]
  %v527 = vld [vmem:[%s1 + $0x690] sm:$0xf]
  %v528 = vld [vmem:[%s1 + $0x694] sm:$0xf]
  %v529 = vld [vmem:[%s1 + $0x698] sm:$0xf]
  %v530 = vld [vmem:[%s1 + $0x69c] sm:$0xf]
  %v531 = vld [vmem:[%s1 + $0x6a0] sm:$0xf]
  %v532 = vld [vmem:[%s1 + $0x6a4] sm:$0xf]
  %v533 = vld [vmem:[%s1 + $0x6a8] sm:$0xf]
  %v534 = vld [vmem:[%s1 + $0x6ac] sm:$0xf]
  %v535 = vld [vmem:[%s1 + $0x6b0] sm:$0xf]
  %v536 = vld [vmem:[%s1 + $0x6b4] sm:$0xf]
  %v537 = vld [vmem:[%s1 + $0x6b8] sm:$0xf]
  %v538 = vld [vmem:[%s1 + $0x6bc] sm:$0xf]
  %v539 = vld [vmem:[%s1 + $0x6c0] sm:$0xf]
  %v540 = vld [vmem:[%s1 + $0x6c4] sm:$0xf]
  %v541 = vld [vmem:[%s1 + $0x6c8] sm:$0xf]
  %v542 = vld [vmem:[%s1 + $0x6cc] sm:$0xf]
  %v543 = vld [vmem:[%s1 + $0x6d0] sm:$0xf]
  %v544 = vld [vmem:[%s1 + $0x6d4] sm:$0xf]
  %v545 = vld [vmem:[%s1 + $0x6d8] sm:$0xf]
  %v546 = vld [vmem:[%s1 + $0x6dc] sm:$0xf]
  %v547 = vld [vmem:[%s1 + $0x6e0] sm:$0xf]
  %v548 = vld [vmem:[%s1 + $0x6e4] sm:$0xf]
  %v549 = vld [vmem:[%s1 + $0x6e8] sm:$0xf]
  %v550 = vld [vmem:[%s1 + $0x6ec] sm:$0xf]
  %v551 = vld [vmem:[%s1 + $0x6f0] sm:$0xf]
  %v552 = vld [vmem:[%s1 + $0x6f4] sm:$0xf]
  %v553 = vld [vmem:[%s1 + $0x6f8] sm:$0xf]
  %v554 = vld [vmem:[%s1 + $0x6fc] sm:$0xf]
  %v555 = vld [vmem:[%s1 + $0x700] sm:$0xf]
  %v556 = vld [vmem:[%s1 + $0x704] sm:$0xf]
  %v557 = vld [vmem:[%s1 + $0x708] sm:$0xf]
  %v558 = vld [vmem:[%s1 + $0x70c] sm:$0xf]
  %v559 = vld [vmem:[%s1 + $0x710] sm:$0xf]
  %v560 = vld [vmem:[%s1 + $0x714] sm:$0xf]
  %v561 = vld [vmem:[%s1 + $0x718] sm:$0xf]
  %v562 = vld [vmem:[%s1 + $0x71c] sm:$0xf]
  %v563 = vld [vmem:[%s1 + $0x720] sm:$0xf]
  %v564 = vld [vmem:[%s1 + $0x724] sm:$0xf]
  %v565 = vld [vmem:[%s1 + $0x728] sm:$0xf]
  %v566 = vld [vmem:[%s1 + $0x72c] sm:$0xf]
  %v567 = vld [vmem:[%s1 + $0x730] sm:$0xf]
  %v568 = vld [vmem:[%s1 + $0x734] sm:$0xf]
  %v569 = vld [vmem:[%s1 + $0x738] sm:$0xf]
  %v570 = vld [vmem:[%s1 + $0x73c] sm:$0xf]
  %v571 = vld [vmem:[%s1 + $0x740] sm:$0xf]
  %v572 = vld [vmem:[%s1 + $0x744] sm:$0xf]
  %v573 = vld [vmem:[%s1 + $0x748] sm:$0xf]
  %v574 = vld [vmem:[%s1 + $0x74c] sm:$0xf]
  %v575 = vld [vmem:[%s1 + $0x750] sm:$0xf]
  %v576 = vld [vmem:[%s1 + $0x754] sm:$0xf]
  %v577 = vld [vmem:[%s1 + $0x758] sm:$0xf]
  %v578 = vld [vmem:[%s1 + $0x75c] sm:$0xf]
  %v579 = vld [vmem:[%s1 + $0x760] sm:$0xf]
  %v580 = vld [vmem:[%s1 + $0x764] sm:$0xf]
  %v581 = vld [vmem:[%s1 + $0x768] sm:$0xf]
  %v582 = vld [vmem:[%s1 + $0x76c] sm:$0xf]
  %v583 = vld [vmem:[%s1 + $0x770] sm:$0xf]
  %v584 = vld [vmem:[%s1 + $0x774] sm:$0xf]
  %v585 = vld [vmem:[%s1 + $0x778] sm:$0xf]
  %v586 = vld [vmem:[%s1 + $0x77c] sm:$0xf]
  %v587 = vld [vmem:[%s1 + $0x780] sm:$0xf]
  %v588 = vld [vmem:[%s1 + $0x784] sm:$0xf]
  %v589 = vld [vmem:[%s1 + $0x788] sm:$0xf]
  %v590 = vld [vmem:[%s1 + $0x78c] sm:$0xf]
  %v591 = vld [vmem:[%s1 + $0x790] sm:$0xf]
  %v592 = vld [vmem:[%s1 + $0x794] sm:$0xf]
  %v593 = vld [vmem:[%s1 + $0x798] sm:$0xf]
  %v594 = vld [vmem:[%s1 + $0x79c] sm:$0xf]
  %v595 = vld [vmem:[%s1 + $0x7a0] sm:$0xf]
  %v596 = vld [vmem:[%s1 + $0x7a4] sm:$0xf]
  %v597 = vld [vmem:[%s1 + $0x7a8] sm:$0xf]
  %v598 = vld [vmem:[%s1 + $0x7ac] sm:$0xf]
  %v599 = vld [vmem:[%s1 + $0x7b0] sm:$0xf]
  %v600 = vld [vmem:[%s1 + $0x7b4] sm:$0xf]
  %v601 = vld [vmem:[%s1 + $0x7b8] sm:$0xf]
  %v602 = vld [vmem:[%s1 + $0x7bc] sm:$0xf]
  %v603 = vld [vmem:[%s1 + $0x7c0] sm:$0xf]
  %v604 = vld [vmem:[%s1 + $0x7c4] sm:$0xf]
  %v605 = vld [vmem:[%s1 + $0x7c8] sm:$0xf]
  %v606 = vld [vmem:[%s1 + $0x7cc] sm:$0xf]
  %v607 = vld [vmem:[%s1 + $0x7d0] sm:$0xf]
  %v608 = vld [vmem:[%s1 + $0x7d4] sm:$0xf]
  %v609 = vld [vmem:[%s1 + $0x7d8] sm:$0xf]
  %v610 = vld [vmem:[%s1 + $0x7dc] sm:$0xf]
  %v611 = vld [vmem:[%s1 + $0x7e0] sm:$0xf]
  %v612 = vld [vmem:[%s1 + $0x7e4] sm:$0xf]
  %v613 = vld [vmem:[%s1 + $0x7e8] sm:$0xf]
  %v614 = vld [vmem:[%s1 + $0x7ec] sm:$0xf]
  %v615 = vld [vmem:[%s1 + $0x7f0] sm:$0xf]
  %v616 = vld [vmem:[%s1 + $0x7f4] sm:$0xf]
  %v617 = vld [vmem:[%s1 + $0x7f8] sm:$0xf]
  %v618 = vld [vmem:[%s1 + $0x7fc] sm:$0xf]
  %v619 = vld [vmem:[%s1 + $0x800] sm:$0xf]
  %v620 = vld [vmem:[%s1 + $0x804] sm:$0xf]
  %v621 = vld [vmem:[%s1 + $0x808] sm:$0xf]
  %v622 = vld [vmem:[%s1 + $0x80c] sm:$0xf]
  %v623 = vld [vmem:[%s1 + $0x810] sm:$0xf]
  %v624 = vld [vmem:[%s1 + $0x814] sm:$0xf]
  %v625 = vld [vmem:[%s1 + $0x818] sm:$0xf]
  %v626 = vld [vmem:[%s1 + $0x81c] sm:$0xf]
  %v627 = vld [vmem:[%s1 + $0x820] sm:$0xf]
  %v628 = vld [vmem:[%s1 + $0x824] sm:$0xf]
  %v629 = vld [vmem:[%s1 + $0x828] sm:$0xf]
  %v630 = vld [vmem:[%s1 + $0x82c] sm:$0xf]
  %v631 = vld [vmem:[%s1 + $0x830] sm:$0xf]
  %v632 = vld [vmem:[%s1 + $0x834] sm:$0xf]
  %v633 = vld [vmem:[%s1 + $0x838] sm:$0xf]
  %v634 = vld [vmem:[%s1 + $0x83c] sm:$0xf]
  %v635 = vld [vmem:[%s1 + $0x840] sm:$0xf]
  %v636 = vld [vmem:[%s1 + $0x844] sm:$0xf]
  %v637 = vld [vmem:[%s1 + $0x848] sm:$0xf]
  %v638 = vld [vmem:[%s1 + $0x84c] sm:$0xf]
  %v639 = vld [vmem:[%s1 + $0x850] sm:$0xf]
  %v640 = vld [vmem:[%s1 + $0x854] sm:$0xf]
  %v641 = vld [vmem:[%s1 + $0x858] sm:$0xf]
  %v642 = vld [vmem:[%s1 + $0x85c] sm:$0xf]
  %v643 = vld [vmem:[%s1 + $0x860] sm:$0xf]
  %v644 = vld [vmem:[%s1 + $0x864] sm:$0xf]
  %v645 = vld [vmem:[%s1 + $0x868] sm:$0xf]
  %v646 = vld [vmem:[%s1 + $0x86c] sm:$0xf]
  %v647 = vld [vmem:[%s1 + $0x870] sm:$0xf]
  %v648 = vld [vmem:[%s1 + $0x874] sm:$0xf]
  %v649 = vld [vmem:[%s1 + $0x878] sm:$0xf]
  %v650 = vld [vmem:[%s1 + $0x87c] sm:$0xf]
  %v651 = vld [vmem:[%s1 + $0x880] sm:$0xf]
  %v652 = vld [vmem:[%s1 + $0x884] sm:$0xf]
  %v653 = vld [vmem:[%s1 + $0x888] sm:$0xf]
  %v654 = vld [vmem:[%s1 + $0x88c] sm:$0xf]
  %v655 = vld [vmem:[%s1 + $0x890] sm:$0xf]
  %v656 = vld [vmem:[%s1 + $0x894] sm:$0xf]
  %v657 = vld [vmem:[%s1 + $0x898] sm:$0xf]
  %v658 = vld [vmem:[%s1 + $0x89c] sm:$0xf]
  %v659 = vld [vmem:[%s1 + $0x8a0] sm:$0xf]
  %v660 = vld [vmem:[%s1 + $0x8a4] sm:$0xf]
  %v661 = vld [vmem:[%s1 + $0x8a8] sm:$0xf]
  %v662 = vld [vmem:[%s1 + $0x8ac] sm:$0xf]
  %v663 = vld [vmem:[%s1 + $0x8b0] sm:$0xf]
  %v664 = vld [vmem:[%s1 + $0x8b4] sm:$0xf]
  %v665 = vld [vmem:[%s1 + $0x8b8] sm:$0xf]
  %v666 = vld [vmem:[%s1 + $0x8bc] sm:$0xf]
  %v667 = vld [vmem:[%s1 + $0x8c0] sm:$0xf]
  %v668 = vld [vmem:[%s1 + $0x8c4] sm:$0xf]
  %v669 = vld [vmem:[%s1 + $0x8c8] sm:$0xf]
  %v670 = vld [vmem:[%s1 + $0x8cc] sm:$0xf]
  %v671 = vld [vmem:[%s1 + $0x8d0] sm:$0xf]
  %v672 = vld [vmem:[%s1 + $0x8d4] sm:$0xf]
  %v673 = vld [vmem:[%s1 + $0x8d8] sm:$0xf]
  %v674 = vld [vmem:[%s1 + $0x8dc] sm:$0xf]
  %v675 = vld [vmem:[%s1 + $0x8e0] sm:$0xf]
  %v676 = vld [vmem:[%s1 + $0x8e4] sm:$0xf]
  %v677 = vld [vmem:[%s1 + $0x8e8] sm:$0xf]
  %v678 = vld [vmem:[%s1 + $0x8ec] sm:$0xf]
  %v679 = vld [vmem:[%s1 + $0x8f0] sm:$0xf]
  %v680 = vld [vmem:[%s1 + $0x8f4] sm:$0xf]
  %v681 = vld [vmem:[%s1 + $0x8f8] sm:$0xf]
  %v682 = vld [vmem:[%s1 + $0x8fc] sm:$0xf]
  %v683 = vld [vmem:[%s1 + $0x900] sm:$0xf]
  %v684 = vld [vmem:[%s1 + $0x904] sm:$0xf]
  %v685 = vld [vmem:[%s1 + $0x908] sm:$0xf]
  %v686 = vld [vmem:[%s1 + $0x90c] sm:$0xf]
  %v687 = vld [vmem:[%s1 + $0x910] sm:$0xf]
  %v688 = vld [vmem:[%s1 + $0x914] sm:$0xf]
  %v689 = vld [vmem:[%s1 + $0x918] sm:$0xf]
  %v690 = vld [vmem:[%s1 + $0x91c] sm:$0xf]
  %v691 = vld [vmem:[%s1 + $0x920] sm:$0xf]
  %v692 = vld [vmem:[%s1 + $0x924] sm:$0xf]
  %v693 = vld [vmem:[%s1 + $0x928] sm:$0xf]
  %v694 = vld [vmem:[%s1 + $0x92c] sm:$0xf]
  %v695 = vld [vmem:[%s1 + $0x930] sm:$0xf]
  %v696 = vld [vmem:[%s1 + $0x934] sm:$0xf]
  %v697 = vld [vmem:[%s1 + $0x938] sm:$0xf]
  %v698 = vld [vmem:[%s1 + $0x93c] sm:$0xf]
  %v699 = vld [vmem:[%s1 + $0x940] sm:$0xf]
  %v700 = vld [vmem:[%s1 + $0x944] sm:$0xf]
  %v701 = vld [vmem:[%s1 + $0x948] sm:$0xf]
  %v702 = vld [vmem:[%s1 + $0x94c] sm:$0xf]
  %v703 = vld [vmem:[%s1 + $0x950] sm:$0xf]
  %v704 = vld [vmem:[%s1 + $0x954] sm:$0xf]
  %v705 = vld [vmem:[%s1 + $0x958] sm:$0xf]
  %v706 = vld [vmem:[%s1 + $0x95c] sm:$0xf]
  %v707 = vld [vmem:[%s1 + $0x960] sm:$0xf]
  %v708 = vld [vmem:[%s1 + $0x964] sm:$0xf]
  %v709 = vld [vmem:[%s1 + $0x968] sm:$0xf]
  %v710 = vld [vmem:[%s1 + $0x96c] sm:$0xf]
  %v711 = vld [vmem:[%s1 + $0x970] sm:$0xf]
  %v712 = vld [vmem:[%s1 + $0x974] sm:$0xf]
  %v713 = vld [vmem:[%s1 + $0x978] sm:$0xf]
  %v714 = vld [vmem:[%s1 + $0x97c] sm:$0xf]
  %v715 = vld [vmem:[%s1 + $0x980] sm:$0xf]
  %v716 = vld [vmem:[%s1 + $0x984] sm:$0xf]
  %v717 = vld [vmem:[%s1 + $0x988] sm:$0xf]
  %v718 = vld [vmem:[%s1 + $0x98c] sm:$0xf]
  %v719 = vld [vmem:[%s1 + $0x990] sm:$0xf]
  %v720 = vld [vmem:[%s1 + $0x994] sm:$0xf]
  %v721 = vld [vmem:[%s1 + $0x998] sm:$0xf]
  %v722 = vld [vmem:[%s1 + $0x99c] sm:$0xf]
  %v723 = vld [vmem:[%s1 + $0x9a0] sm:$0xf]
  %v724 = vld [vmem:[%s1 + $0x9a4] sm:$0xf]
  %v725 = vld [vmem:[%s1 + $0x9a8] sm:$0xf]
  %v726 = vld [vmem:[%s1 + $0x9ac] sm:$0xf]
  %v727 = vld [vmem:[%s1 + $0x9b0] sm:$0xf]
  %v728 = vld [vmem:[%s1 + $0x9b4] sm:$0xf]
  %v729 = vld [vmem:[%s1 + $0x9b8] sm:$0xf]
  %v730 = vld [vmem:[%s1 + $0x9bc] sm:$0xf]
  %v731 = vld [vmem:[%s1 + $0x9c0] sm:$0xf]
  %v732 = vld [vmem:[%s1 + $0x9c4] sm:$0xf]
  %v733 = vld [vmem:[%s1 + $0x9c8] sm:$0xf]
  %v734 = vld [vmem:[%s1 + $0x9cc] sm:$0xf]
  %v735 = vld [vmem:[%s1 + $0x9d0] sm:$0xf]
  %v736 = vld [vmem:[%s1 + $0x9d4] sm:$0xf]
  %v737 = vld [vmem:[%s1 + $0x9d8] sm:$0xf]
  %v738 = vld [vmem:[%s1 + $0x9dc] sm:$0xf]
  %v739 = vld [vmem:[%s1 + $0x9e0] sm:$0xf]
  %v740 = vld [vmem:[%s1 + $0x9e4] sm:$0xf]
  %v741 = vld [vmem:[%s1 + $0x9e8] sm:$0xf]
  %v742 = vld [vmem:[%s1 + $0x9ec] sm:$0xf]
  %v743 = vld [vmem:[%s1 + $0x9f0] sm:$0xf]
  %v744 = vld [vmem:[%s1 + $0x9f4] sm:$0xf]
  %v745 = vld [vmem:[%s1 + $0x9f8] sm:$0xf]
  %v746 = vld [vmem:[%s1 + $0x9fc] sm:$0xf]
  %v747 = vld [vmem:[%s1 + $0xa00] sm:$0xf]
  %v748 = vld [vmem:[%s1 + $0xa04] sm:$0xf]
  %v749 = vld [vmem:[%s1 + $0xa08] sm:$0xf]
  %v750 = vld [vmem:[%s1 + $0xa0c] sm:$0xf]
  %v751 = vld [vmem:[%s1 + $0xa10] sm:$0xf]
  %v752 = vld [vmem:[%s1 + $0xa14] sm:$0xf]
  %v753 = vld [vmem:[%s1 + $0xa18] sm:$0xf]
  %v754 = vld [vmem:[%s1 + $0xa1c] sm:$0xf]
  %v755 = vld [vmem:[%s1 + $0xa20] sm:$0xf]
  %v756 = vld [vmem:[%s1 + $0xa24] sm:$0xf]
  %v757 = vld [vmem:[%s1 + $0xa28] sm:$0xf]
  %v758 = vld [vmem:[%s1 + $0xa2c] sm:$0xf]
  %v759 = vld [vmem:[%s1 + $0xa30] sm:$0xf]
  %v760 = vld [vmem:[%s1 + $0xa34] sm:$0xf]
  %v761 = vld [vmem:[%s1 + $0xa38] sm:$0xf]
  %v762 = vld [vmem:[%s1 + $0xa3c] sm:$0xf]
  %v763 = vld [vmem:[%s1 + $0xa40] sm:$0xf]
  %v764 = vld [vmem:[%s1 + $0xa44] sm:$0xf]
  %v765 = vld [vmem:[%s1 + $0xa48] sm:$0xf]
  %v766 = vld [vmem:[%s1 + $0xa4c] sm:$0xf]
  %v767 = vld [vmem:[%s1 + $0xa50] sm:$0xf]
  %v768 = vld [vmem:[%s1 + $0xa54] sm:$0xf]
  %v769 = vld [vmem:[%s1 + $0xa58] sm:$0xf]
  %v770 = vld [vmem:[%s1 + $0xa5c] sm:$0xf]
  %v771 = vld [vmem:[%s1 + $0xa60] sm:$0xf]
  %v772 = vld [vmem:[%s1 + $0xa64] sm:$0xf]
  %v773 = vld [vmem:[%s1 + $0xa68] sm:$0xf]
  %v774 = vld [vmem:[%s1 + $0xa6c] sm:$0xf]
  %v775 = vld [vmem:[%s1 + $0xa70] sm:$0xf]
  %v776 = vld [vmem:[%s1 + $0xa74] sm:$0xf]
  %v777 = vld [vmem:[%s1 + $0xa78] sm:$0xf]
  %v778 = vld [vmem:[%s1 + $0xa7c] sm:$0xf]
  %v779 = vld [vmem:[%s1 + $0xa80] sm:$0xf]
  %v780 = vld [vmem:[%s1 + $0xa84] sm:$0xf]
  %v781 = vld [vmem:[%s1 + $0xa88] sm:$0xf]
  %v782 = vld [vmem:[%s1 + $0xa8c] sm:$0xf]
  %v783 = vld [vmem:[%s1 + $0xa90] sm:$0xf]
  %v784 = vld [vmem:[%s1 + $0xa94] sm:$0xf]
  %v785 = vld [vmem:[%s1 + $0xa98] sm:$0xf]
  %v786 = vld [vmem:[%s1 + $0xa9c] sm:$0xf]
  %v787 = vld [vmem:[%s1 + $0xaa0] sm:$0xf]
  %v788 = vld [vmem:[%s1 + $0xaa4] sm:$0xf]
  %v789 = vld [vmem:[%s1 + $0xaa8] sm:$0xf]
  %v790 = vld [vmem:[%s1 + $0xaac] sm:$0xf]
  %v791 = vld [vmem:[%s1 + $0xab0] sm:$0xf]
  %v792 = vld [vmem:[%s1 + $0xab4] sm:$0xf]
  %v793 = vld [vmem:[%s1 + $0xab8] sm:$0xf]
  %v794 = vld [vmem:[%s1 + $0xabc] sm:$0xf]
  %v795 = vld [vmem:[%s1 + $0xac0] sm:$0xf]
  %v796 = vld [vmem:[%s1 + $0xac4] sm:$0xf]
  %v797 = vld [vmem:[%s1 + $0xac8] sm:$0xf]
  %v798 = vld [vmem:[%s1 + $0xacc] sm:$0xf]
  %v799 = vld [vmem:[%s1 + $0xad0] sm:$0xf]
  %v800 = vld [vmem:[%s1 + $0xad4] sm:$0xf]
  %v801 = vld [vmem:[%s1 + $0xad8] sm:$0xf]
  %v802 = vld [vmem:[%s1 + $0xadc] sm:$0xf]
  %v803 = vld [vmem:[%s1 + $0xae0] sm:$0xf]
  %v804 = vld [vmem:[%s1 + $0xae4] sm:$0xf]
  %v805 = vld [vmem:[%s1 + $0xae8] sm:$0xf]
  %v806 = vld [vmem:[%s1 + $0xaec] sm:$0xf]
  %v807 = vld [vmem:[%s1 + $0xaf0] sm:$0xf]
  %v808 = vld [vmem:[%s1 + $0xaf4] sm:$0xf]
  %v809 = vld [vmem:[%s1 + $0xaf8] sm:$0xf]
  %v810 = vld [vmem:[%s1 + $0xafc] sm:$0xf]
  %v811 = vld [vmem:[%s1 + $0xb00] sm:$0xf]
  %v812 = vld [vmem:[%s1 + $0xb04] sm:$0xf]
  %v813 = vld [vmem:[%s1 + $0xb08] sm:$0xf]
  %v814 = vld [vmem:[%s1 + $0xb0c] sm:$0xf]
  %v815 = vld [vmem:[%s1 + $0xb10] sm:$0xf]
  %v816 = vld [vmem:[%s1 + $0xb14] sm:$0xf]
  %v817 = vld [vmem:[%s1 + $0xb18] sm:$0xf]
  %v818 = vld [vmem:[%s1 + $0xb1c] sm:$0xf]
  %v819 = vld [vmem:[%s1 + $0xb20] sm:$0xf]
  %v820 = vld [vmem:[%s1 + $0xb24] sm:$0xf]
  %v821 = vld [vmem:[%s1 + $0xb28] sm:$0xf]
  %v822 = vld [vmem:[%s1 + $0xb2c] sm:$0xf]
  %v823 = vld [vmem:[%s1 + $0xb30] sm:$0xf]
  %v824 = vld [vmem:[%s1 + $0xb34] sm:$0xf]
  %v825 = vld [vmem:[%s1 + $0xb38] sm:$0xf]
  %v826 = vld [vmem:[%s1 + $0xb3c] sm:$0xf]
  %v827 = vld [vmem:[%s1 + $0xb40] sm:$0xf]
  %v828 = vld [vmem:[%s1 + $0xb44] sm:$0xf]
  %v829 = vld [vmem:[%s1 + $0xb48] sm:$0xf]
  %v830 = vld [vmem:[%s1 + $0xb4c] sm:$0xf]
  %v831 = vld [vmem:[%s1 + $0xb50] sm:$0xf]
  %v832 = vld [vmem:[%s1 + $0xb54] sm:$0xf]
  %v833 = vld [vmem:[%s1 + $0xb58] sm:$0xf]
  %v834 = vld [vmem:[%s1 + $0xb5c] sm:$0xf]
  %v835 = vld [vmem:[%s1 + $0xb60] sm:$0xf]
  %v836 = vld [vmem:[%s1 + $0xb64] sm:$0xf]
  %v837 = vld [vmem:[%s1 + $0xb68] sm:$0xf]
  %v838 = vld [vmem:[%s1 + $0xb6c] sm:$0xf]
  %v839 = vld [vmem:[%s1 + $0xb70] sm:$0xf]
  %v840 = vld [vmem:[%s1 + $0xb74] sm:$0xf]
  %v841 = vld [vmem:[%s1 + $0xb78] sm:$0xf]
  %v842 = vld [vmem:[%s1 + $0xb7c] sm:$0xf]
  %v843 = vld [vmem:[%s1 + $0xb80] sm:$0xf]
  %v844 = vld [vmem:[%s1 + $0xb84] sm:$0xf]
  %v845 = vld [vmem:[%s1 + $0xb88] sm:$0xf]
  %v846 = vld [vmem:[%s1 + $0xb8c] sm:$0xf]
  %v847 = vld [vmem:[%s1 + $0xb90] sm:$0xf]
  %v848 = vld [vmem:[%s1 + $0xb94] sm:$0xf]
  %v849 = vld [vmem:[%s1 + $0xb98] sm:$0xf]
  %v850 = vld [vmem:[%s1 + $0xb9c] sm:$0xf]
  %v851 = vld [vmem:[%s1 + $0xba0] sm:$0xf]
  %v852 = vld [vmem:[%s1 + $0xba4] sm:$0xf]
  %v853 = vld [vmem:[%s1 + $0xba8] sm:$0xf]
  %v854 = vld [vmem:[%s1 + $0xbac] sm:$0xf]
  %v855 = vld [vmem:[%s1 + $0xbb0] sm:$0xf]
  %v856 = vld [vmem:[%s1 + $0xbb4] sm:$0xf]
  %v857 = vld [vmem:[%s1 + $0xbb8] sm:$0xf]
  %v858 = vld [vmem:[%s1 + $0xbbc] sm:$0xf]
  %v859 = vld [vmem:[%s1 + $0xbc0] sm:$0xf]
  %v860 = vld [vmem:[%s1 + $0xbc4] sm:$0xf]
  %v861 = vld [vmem:[%s1 + $0xbc8] sm:$0xf]
  %v862 = vld [vmem:[%s1 + $0xbcc] sm:$0xf]
  %v863 = vld [vmem:[%s1 + $0xbd0] sm:$0xf]
  %v864 = vld [vmem:[%s1 + $0xbd4] sm:$0xf]
  %v865 = vld [vmem:[%s1 + $0xbd8] sm:$0xf]
  %v866 = vld [vmem:[%s1 + $0xbdc] sm:$0xf]
  %v867 = vld [vmem:[%s1 + $0xbe0] sm:$0xf]
  %v868 = vld [vmem:[%s1 + $0xbe4] sm:$0xf]
  %v869 = vld [vmem:[%s1 + $0xbe8] sm:$0xf]
  %v870 = vld [vmem:[%s1 + $0xbec] sm:$0xf]
  %v871 = vld [vmem:[%s1 + $0xbf0] sm:$0xf]
  %v872 = vld [vmem:[%s1 + $0xbf4] sm:$0xf]
  %v873 = vld [vmem:[%s1 + $0xbf8] sm:$0xf]
  %v874 = vld [vmem:[%s1 + $0xbfc] sm:$0xf]
  %v875 = vld [vmem:[%s1 + $0xc00] sm:$0xf]
  %v876 = vld [vmem:[%s1 + $0xc04] sm:$0xf]
  %v877 = vld [vmem:[%s1 + $0xc08] sm:$0xf]
  %v878 = vld [vmem:[%s1 + $0xc0c] sm:$0xf]
  %v879 = vld [vmem:[%s1 + $0xc10] sm:$0xf]
  %v880 = vld [vmem:[%s1 + $0xc14] sm:$0xf]
  %v881 = vld [vmem:[%s1 + $0xc18] sm:$0xf]
  %v882 = vld [vmem:[%s1 + $0xc1c] sm:$0xf]
  %v883 = vld [vmem:[%s1 + $0xc20] sm:$0xf]
  %v884 = vld [vmem:[%s1 + $0xc24] sm:$0xf]
  %v885 = vld [vmem:[%s1 + $0xc28] sm:$0xf]
  %v886 = vld [vmem:[%s1 + $0xc2c] sm:$0xf]
  %v887 = vld [vmem:[%s1 + $0xc30] sm:$0xf]
  %v888 = vld [vmem:[%s1 + $0xc34] sm:$0xf]
  %v889 = vld [vmem:[%s1 + $0xc38] sm:$0xf]
  %v890 = vld [vmem:[%s1 + $0xc3c] sm:$0xf]
  %v891 = vld [vmem:[%s1 + $0xc40] sm:$0xf]
  %v892 = vld [vmem:[%s1 + $0xc44] sm:$0xf]
  %v893 = vld [vmem:[%s1 + $0xc48] sm:$0xf]
  %v894 = vld [vmem:[%s1 + $0xc4c] sm:$0xf]
  %v895 = vld [vmem:[%s1 + $0xc50] sm:$0xf]
  %v896 = vld [vmem:[%s1 + $0xc54] sm:$0xf]
  %v897 = vld [vmem:[%s1 + $0xc58] sm:$0xf]
  %v898 = vld [vmem:[%s1 + $0xc5c] sm:$0xf]
  %v899 = vld [vmem:[%s1 + $0xc60] sm:$0xf]
  %v900 = vld [vmem:[%s1 + $0xc64] sm:$0xf]
  %v901 = vld [vmem:[%s1 + $0xc68] sm:$0xf]
  %v902 = vld [vmem:[%s1 + $0xc6c] sm:$0xf]
  %v903 = vld [vmem:[%s1 + $0xc70] sm:$0xf]
  %v904 = vld [vmem:[%s1 + $0xc74] sm:$0xf]
  %v905 = vld [vmem:[%s1 + $0xc78] sm:$0xf]
  %v906 = vld [vmem:[%s1 + $0xc7c] sm:$0xf]
  %v907 = vld [vmem:[%s1 + $0xc80] sm:$0xf]
  %v908 = vld [vmem:[%s1 + $0xc84] sm:$0xf]
  %v909 = vld [vmem:[%s1 + $0xc88] sm:$0xf]
  %v910 = vld [vmem:[%s1 + $0xc8c] sm:$0xf]
  %v911 = vld [vmem:[%s1 + $0xc90] sm:$0xf]
  %v912 = vld [vmem:[%s1 + $0xc94] sm:$0xf]
  %v913 = vld [vmem:[%s1 + $0xc98] sm:$0xf]
  %v914 = vld [vmem:[%s1 + $0xc9c] sm:$0xf]
  %v915 = vld [vmem:[%s1 + $0xca0] sm:$0xf]
  %v916 = vld [vmem:[%s1 + $0xca4] sm:$0xf]
  %v917 = vld [vmem:[%s1 + $0xca8] sm:$0xf]
  %v918 = vld [vmem:[%s1 + $0xcac] sm:$0xf]
  %v919 = vld [vmem:[%s1 + $0xcb0] sm:$0xf]
  %v920 = vld [vmem:[%s1 + $0xcb4] sm:$0xf]
  %v921 = vld [vmem:[%s1 + $0xcb8] sm:$0xf]
  %v922 = vld [vmem:[%s1 + $0xcbc] sm:$0xf]
  %v923 = vld [vmem:[%s1 + $0xcc0] sm:$0xf]
  %v924 = vld [vmem:[%s1 + $0xcc4] sm:$0xf]
  %v925 = vld [vmem:[%s1 + $0xcc8] sm:$0xf]
  %v926 = vld [vmem:[%s1 + $0xccc] sm:$0xf]
  %v927 = vld [vmem:[%s1 + $0xcd0] sm:$0xf]
  %v928 = vld [vmem:[%s1 + $0xcd4] sm:$0xf]
  %v929 = vld [vmem:[%s1 + $0xcd8] sm:$0xf]
  %v930 = vld [vmem:[%s1 + $0xcdc] sm:$0xf]
  %v931 = vld [vmem:[%s1 + $0xce0] sm:$0xf]
  %v932 = vld [vmem:[%s1 + $0xce4] sm:$0xf]
  %v933 = vld [vmem:[%s1 + $0xce8] sm:$0xf]
  %v934 = vld [vmem:[%s1 + $0xcec] sm:$0xf]
  %v935 = vld [vmem:[%s1 + $0xcf0] sm:$0xf]
  %v936 = vld [vmem:[%s1 + $0xcf4] sm:$0xf]
  %v937 = vld [vmem:[%s1 + $0xcf8] sm:$0xf]
  %v938 = vld [vmem:[%s1 + $0xcfc] sm:$0xf]
  %v939 = vld [vmem:[%s1 + $0xd00] sm:$0xf]
  %v940 = vld [vmem:[%s1 + $0xd04] sm:$0xf]
  %v941 = vld [vmem:[%s1 + $0xd08] sm:$0xf]
  %v942 = vld [vmem:[%s1 + $0xd0c] sm:$0xf]
  %v943 = vld [vmem:[%s1 + $0xd10] sm:$0xf]
  %v944 = vld [vmem:[%s1 + $0xd14] sm:$0xf]
  %v945 = vld [vmem:[%s1 + $0xd18] sm:$0xf]
  %v946 = vld [vmem:[%s1 + $0xd1c] sm:$0xf]
  %v947 = vld [vmem:[%s1 + $0xd20] sm:$0xf]
  %v948 = vld [vmem:[%s1 + $0xd24] sm:$0xf]
  %v949 = vld [vmem:[%s1 + $0xd28] sm:$0xf]
  %v950 = vld [vmem:[%s1 + $0xd2c] sm:$0xf]
  %v951 = vld [vmem:[%s1 + $0xd30] sm:$0xf]
  %v952 = vld [vmem:[%s1 + $0xd34] sm:$0xf]
  %v953 = vld [vmem:[%s1 + $0xd38] sm:$0xf]
  %v954 = vld [vmem:[%s1 + $0xd3c] sm:$0xf]
  %v955 = vld [vmem:[%s1 + $0xd40] sm:$0xf]
  %v956 = vld [vmem:[%s1 + $0xd44] sm:$0xf]
  %v957 = vld [vmem:[%s1 + $0xd48] sm:$0xf]
  %v958 = vld [vmem:[%s1 + $0xd4c] sm:$0xf]
  %v959 = vld [vmem:[%s1 + $0xd50] sm:$0xf]
  %v960 = vld [vmem:[%s1 + $0xd54] sm:$0xf]
  %v961 = vld [vmem:[%s1 + $0xd58] sm:$0xf]
  %v962 = vld [vmem:[%s1 + $0xd5c] sm:$0xf]
  %v963 = vld [vmem:[%s1 + $0xd60] sm:$0xf]
  %v964 = vld [vmem:[%s1 + $0xd64] sm:$0xf]
  %v965 = vld [vmem:[%s1 + $0xd68] sm:$0xf]
  %v966 = vld [vmem:[%s1 + $0xd6c] sm:$0xf]
  %v967 = vld [vmem:[%s1 + $0xd70] sm:$0xf]
  %v968 = vld [vmem:[%s1 + $0xd74] sm:$0xf]
  %v969 = vld [vmem:[%s1 + $0xd78] sm:$0xf]
  %v970 = vld [vmem:[%s1 + $0xd7c] sm:$0xf]
  %v971 = vld [vmem:[%s1 + $0xd80] sm:$0xf]
  %v972 = vld [vmem:[%s1 + $0xd84] sm:$0xf]
  %v973 = vld [vmem:[%s1 + $0xd88] sm:$0xf]
  %v974 = vld [vmem:[%s1 + $0xd8c] sm:$0xf]
  %v975 = vld [vmem:[%s1 + $0xd90] sm:$0xf]
  %v976 = vld [vmem:[%s1 + $0xd94] sm:$0xf]
  %v977 = vld [vmem:[%s1 + $0xd98] sm:$0xf]
  %v978 = vld [vmem:[%s1 + $0xd9c] sm:$0xf]
  %v979 = vld [vmem:[%s1 + $0xda0] sm:$0xf]
  %v980 = vld [vmem:[%s1 + $0xda4] sm:$0xf]
  %v981 = vld [vmem:[%s1 + $0xda8] sm:$0xf]
  %v982 = vld [vmem:[%s1 + $0xdac] sm:$0xf]
  %v983 = vld [vmem:[%s1 + $0xdb0] sm:$0xf]
  %v984 = vld [vmem:[%s1 + $0xdb4] sm:$0xf]
  %v985 = vld [vmem:[%s1 + $0xdb8] sm:$0xf]
  %v986 = vld [vmem:[%s1 + $0xdbc] sm:$0xf]
  %v987 = vld [vmem:[%s1 + $0xdc0] sm:$0xf]
  %v988 = vld [vmem:[%s1 + $0xdc4] sm:$0xf]
  %v989 = vld [vmem:[%s1 + $0xdc8] sm:$0xf]
  %v990 = vld [vmem:[%s1 + $0xdcc] sm:$0xf]
  %v991 = vld [vmem:[%s1 + $0xdd0] sm:$0xf]
  %v992 = vld [vmem:[%s1 + $0xdd4] sm:$0xf]
  %v993 = vld [vmem:[%s1 + $0xdd8] sm:$0xf]
  %v994 = vld [vmem:[%s1 + $0xddc] sm:$0xf]
  %v995 = vld [vmem:[%s1 + $0xde0] sm:$0xf]
  %v996 = vld [vmem:[%s1 + $0xde4] sm:$0xf]
  %v997 = vld [vmem:[%s1 + $0xde8] sm:$0xf]
  %v998 = vld [vmem:[%s1 + $0xdec] sm:$0xf]
  %v999 = vld [vmem:[%s1 + $0xdf0] sm:$0xf]
  %v1000 = vld [vmem:[%s1 + $0xdf4] sm:$0xf]
  %v1001 = vld [vmem:[%s1 + $0xdf8] sm:$0xf]
  %v1002 = vld [vmem:[%s1 + $0xdfc] sm:$0xf]
  %v1003 = vld [vmem:[%s1 + $0xe00] sm:$0xf]
  %v1004 = vld [vmem:[%s1 + $0xe04] sm:$0xf]
  %v1005 = vld [vmem:[%s1 + $0xe08] sm:$0xf]
  %v1006 = vld [vmem:[%s1 + $0xe0c] sm:$0xf]
  %v1007 = vld [vmem:[%s1 + $0xe10] sm:$0xf]
  %v1008 = vld [vmem:[%s1 + $0xe14] sm:$0xf]
  %v1009 = vld [vmem:[%s1 + $0xe18] sm:$0xf]
  %v1010 = vld [vmem:[%s1 + $0xe1c] sm:$0xf]
  %v1011 = vld [vmem:[%s1 + $0xe20] sm:$0xf]
  %v1012 = vld [vmem:[%s1 + $0xe24] sm:$0xf]
  %v1013 = vld [vmem:[%s1 + $0xe28] sm:$0xf]
  %v1014 = vld [vmem:[%s1 + $0xe2c] sm:$0xf]
  %v1015 = vld [vmem:[%s1 + $0xe30] sm:$0xf]
  %v1016 = vld [vmem:[%s1 + $0xe34] sm:$0xf]
  %v1017 = vld [vmem:[%s1 + $0xe38] sm:$0xf]
  %v1018 = vld [vmem:[%s1 + $0xe3c] sm:$0xf]
  %v1019 = vld [vmem:[%s1 + $0xe40] sm:$0xf]
  %v1020 = vld [vmem:[%s1 + $0xe44] sm:$0xf]
  %v1021 = vld [vmem:[%s1 + $0xe48] sm:$0xf]
  %v1022 = vld [vmem:[%s1 + $0xe4c] sm:$0xf]
  %v1023 = vld [vmem:[%s1 + $0xe50] sm:$0xf]
  %v1024 = vld [vmem:[%s1 + $0xe54] sm:$0xf]
  %v1025 = vld [vmem:[%s1 + $0xe58] sm:$0xf]
  %v1026 = vld [vmem:[%s1 + $0xe5c] sm:$0xf]
  %v1027 = vld [vmem:[%s1 + $0xe60] sm:$0xf]
  %v1028 = vld [vmem:[%s1 + $0xe64] sm:$0xf]
  %v1029 = vld [vmem:[%s1 + $0xe68] sm:$0xf]
  %v1030 = vld [vmem:[%s1 + $0xe6c] sm:$0xf]
  %v1031 = vld [vmem:[%s1 + $0xe70] sm:$0xf]
  %v1032 = vld [vmem:[%s1 + $0xe74] sm:$0xf]
  %v1033 = vld [vmem:[%s1 + $0xe78] sm:$0xf]
  %v1034 = vld [vmem:[%s1 + $0xe7c] sm:$0xf]
  %v1035 = vld [vmem:[%s1 + $0xe80] sm:$0xf]
  %v1036 = vld [vmem:[%s1 + $0xe84] sm:$0xf]
  %v1037 = vld [vmem:[%s1 + $0xe88] sm:$0xf]
  %v1038 = vld [vmem:[%s1 + $0xe8c] sm:$0xf]
  %v1039 = vld [vmem:[%s1 + $0xe90] sm:$0xf]
  %v1040 = vld [vmem:[%s1 + $0xe94] sm:$0xf]
  %v1041 = vld [vmem:[%s1 + $0xe98] sm:$0xf]
  %v1042 = vld [vmem:[%s1 + $0xe9c] sm:$0xf]
  %v1043 = vld [vmem:[%s1 + $0xea0] sm:$0xf]
  %v1044 = vld [vmem:[%s1 + $0xea4] sm:$0xf]
  %v1045 = vld [vmem:[%s1 + $0xea8] sm:$0xf]
  %v1046 = vld [vmem:[%s1 + $0xeac] sm:$0xf]
  %v1047 = vld [vmem:[%s1 + $0xeb0] sm:$0xf]
  %v1048 = vld [vmem:[%s1 + $0xeb4] sm:$0xf]
  %v1049 = vld [vmem:[%s1 + $0xeb8] sm:$0xf]
  %v1050 = vld [vmem:[%s1 + $0xebc] sm:$0xf]
  %v1051 = vld [vmem:[%s1 + $0xec0] sm:$0xf]
  %v1052 = vld [vmem:[%s1 + $0xec4] sm:$0xf]
  %v1053 = vld [vmem:[%s1 + $0xec8] sm:$0xf]
  %v1054 = vld [vmem:[%s1 + $0xecc] sm:$0xf]
  %v1055 = vld [vmem:[%s1 + $0xed0] sm:$0xf]
  %v1056 = vld [vmem:[%s1 + $0xed4] sm:$0xf]
  %v1057 = vld [vmem:[%s1 + $0xed8] sm:$0xf]
  %v1058 = vld [vmem:[%s1 + $0xedc] sm:$0xf]
  %v1059 = vld [vmem:[%s1 + $0xee0] sm:$0xf]
  %v1060 = vld [vmem:[%s1 + $0xee4] sm:$0xf]
  %v1061 = vld [vmem:[%s1 + $0xee8] sm:$0xf]
  %v1062 = vld [vmem:[%s1 + $0xeec] sm:$0xf]
  %v1063 = vld [vmem:[%s1 + $0xef0] sm:$0xf]
  %v1064 = vld [vmem:[%s1 + $0xef4] sm:$0xf]
  %v1065 = vld [vmem:[%s1 + $0xef8] sm:$0xf]
  %v1066 = vld [vmem:[%s1 + $0xefc] sm:$0xf]
  %v1067 = vld [vmem:[%s1 + $0xf00] sm:$0xf]
  %v1068 = vld [vmem:[%s1 + $0xf04] sm:$0xf]
  %v1069 = vld [vmem:[%s1 + $0xf08] sm:$0xf]
  %v1070 = vld [vmem:[%s1 + $0xf0c] sm:$0xf]
  %v1071 = vld [vmem:[%s1 + $0xf10] sm:$0xf]
  %v1072 = vld [vmem:[%s1 + $0xf14] sm:$0xf]
  %v1073 = vld [vmem:[%s1 + $0xf18] sm:$0xf]
  %v1074 = vld [vmem:[%s1 + $0xf1c] sm:$0xf]
  %v1075 = vld [vmem:[%s1 + $0xf20] sm:$0xf]
  %v1076 = vld [vmem:[%s1 + $0xf24] sm:$0xf]
  %v1077 = vld [vmem:[%s1 + $0xf28] sm:$0xf]
  %v1078 = vld [vmem:[%s1 + $0xf2c] sm:$0xf]
  %v1079 = vld [vmem:[%s1 + $0xf30] sm:$0xf]
  %v1080 = vld [vmem:[%s1 + $0xf34] sm:$0xf]
  %v1081 = vld [vmem:[%s1 + $0xf38] sm:$0xf]
  %v1082 = vld [vmem:[%s1 + $0xf3c] sm:$0xf]
  %v1083 = vld [vmem:[%s1 + $0xf40] sm:$0xf]
  %v1084 = vld [vmem:[%s1 + $0xf44] sm:$0xf]
  %v1085 = vld [vmem:[%s1 + $0xf48] sm:$0xf]
  %v1086 = vld [vmem:[%s1 + $0xf4c] sm:$0xf]
  %v1087 = vld [vmem:[%s1 + $0xf50] sm:$0xf]
  %v1088 = vld [vmem:[%s1 + $0xf54] sm:$0xf]
  %v1089 = vld [vmem:[%s1 + $0xf58] sm:$0xf]
  %v1090 = vld [vmem:[%s1 + $0xf5c] sm:$0xf]
  %v1091 = vld [vmem:[%s1 + $0xf60] sm:$0xf]
  %v1092 = vld [vmem:[%s1 + $0xf64] sm:$0xf]
  %v1093 = vld [vmem:[%s1 + $0xf68] sm:$0xf]
  %v1094 = vld [vmem:[%s1 + $0xf6c] sm:$0xf]
  %v1095 = vld [vmem:[%s1 + $0xf70] sm:$0xf]
  %v1096 = vld [vmem:[%s1 + $0xf74] sm:$0xf]
  %v1097 = vld [vmem:[%s1 + $0xf78] sm:$0xf]
  %v1098 = vld [vmem:[%s1 + $0xf7c] sm:$0xf]
  %v1099 = vld [vmem:[%s1 + $0xf80] sm:$0xf]
  %v1100 = vld [vmem:[%s1 + $0xf84] sm:$0xf]
  %v1101 = vld [vmem:[%s1 + $0xf88] sm:$0xf]
  %v1102 = vld [vmem:[%s1 + $0xf8c] sm:$0xf]
  %v1103 = vld [vmem:[%s1 + $0xf90] sm:$0xf]
  %v1104 = vld [vmem:[%s1 + $0xf94] sm:$0xf]
  %v1105 = vld [vmem:[%s1 + $0xf98] sm:$0xf]
  %v1106 = vld [vmem:[%s1 + $0xf9c] sm:$0xf]
  %v1107 = vld [vmem:[%s1 + $0xfa0] sm:$0xf]
  %v1108 = vld [vmem:[%s1 + $0xfa4] sm:$0xf]
  %v1109 = vld [vmem:[%s1 + $0xfa8] sm:$0xf]
  %v1110 = vld [vmem:[%s1 + $0xfac] sm:$0xf]
  %v1111 = vld [vmem:[%s1 + $0xfb0] sm:$0xf]
  %v1112 = vld [vmem:[%s1 + $0xfb4] sm:$0xf]
  %v1113 = vld [vmem:[%s1 + $0xfb8] sm:$0xf]
  %v1114 = vld [vmem:[%s1 + $0xfbc] sm:$0xf]
  %v1115 = vld [vmem:[%s1 + $0xfc0] sm:$0xf]
  %v1116 = vld [vmem:[%s1 + $0xfc4] sm:$0xf]
  %v1117 = vld [vmem:[%s1 + $0xfc8] sm:$0xf]
  %v1118 = vld [vmem:[%s1 + $0xfcc] sm:$0xf]
  %v1119 = vld [vmem:[%s1 + $0xfd0] sm:$0xf]
  %v1120 = vld [vmem:[%s1 + $0xfd4] sm:$0xf]
  %v1121 = vld [vmem:[%s1 + $0xfd8] sm:$0xf]
  %v1122 = vld [vmem:[%s1 + $0xfdc] sm:$0xf]
  %v1123 = vld [vmem:[%s1 + $0xfe0] sm:$0xf]
  %v1124 = vld [vmem:[%s1 + $0xfe4] sm:$0xf]
  %v1125 = vld [vmem:[%s1 + $0xfe8] sm:$0xf]
  %v1126 = vld [vmem:[%s1 + $0xfec] sm:$0xf]
  %v1127 = vld [vmem:[%s1 + $0xff0] sm:$0xf]
  %v1128 = vld [vmem:[%s1 + $0xff4] sm:$0xf]
  %v1129 = vld [vmem:[%s1 + $0xff8] sm:$0xf]
  %v1130 = vld [vmem:[%s1 + $0xffc] sm:$0xf]
  %v1131 = vld [vmem:[%s1 + $0x1000] sm:$0xf]
  %v1132 = vld [vmem:[%s1 + $0x1004] sm:$0xf]
  %v1133 = vld [vmem:[%s1 + $0x1008] sm:$0xf]
  %v1134 = vld [vmem:[%s1 + $0x100c] sm:$0xf]
  %v1135 = vld [vmem:[%s1 + $0x1010] sm:$0xf]
  %v1136 = vld [vmem:[%s1 + $0x1014] sm:$0xf]
  %v1137 = vld [vmem:[%s1 + $0x1018] sm:$0xf]
  %v1138 = vld [vmem:[%s1 + $0x101c] sm:$0xf]
  %v1139 = vld [vmem:[%s1 + $0x1020] sm:$0xf]
  %v1140 = vld [vmem:[%s1 + $0x1024] sm:$0xf]
  %v1141 = vld [vmem:[%s1 + $0x1028] sm:$0xf]
  %v1142 = vld [vmem:[%s1 + $0x102c] sm:$0xf]
  %v1143 = vld [vmem:[%s1 + $0x1030] sm:$0xf]
  %v1144 = vld [vmem:[%s1 + $0x1034] sm:$0xf]
  %v1145 = vld [vmem:[%s1 + $0x1038] sm:$0xf]
  %v1146 = vld [vmem:[%s1 + $0x103c] sm:$0xf]
  %v1147 = vld [vmem:[%s1 + $0x1040] sm:$0xf]
  %v1148 = vld [vmem:[%s1 + $0x1044] sm:$0xf]
  %v1149 = vld [vmem:[%s1 + $0x1048] sm:$0xf]
  %v1150 = vld [vmem:[%s1 + $0x104c] sm:$0xf]
  %v1151 = vld [vmem:[%s1 + $0x1050] sm:$0xf]
  %v1152 = vld [vmem:[%s1 + $0x1054] sm:$0xf]
  %v1153 = vld [vmem:[%s1 + $0x1058] sm:$0xf]
  %v1154 = vld [vmem:[%s1 + $0x105c] sm:$0xf]
  %v1155 = vld [vmem:[%s1 + $0x1060] sm:$0xf]
  %v1156 = vld [vmem:[%s1 + $0x1064] sm:$0xf]
  %v1157 = vld [vmem:[%s1 + $0x1068] sm:$0xf]
  %v1158 = vld [vmem:[%s1 + $0x106c] sm:$0xf]
  %v1159 = vld [vmem:[%s1 + $0x1070] sm:$0xf]
  %v1160 = vld [vmem:[%s1 + $0x1074] sm:$0xf]
  %v1161 = vld [vmem:[%s1 + $0x1078] sm:$0xf]
  %v1162 = vld [vmem:[%s1 + $0x107c] sm:$0xf]
  %v1163 = vld [vmem:[%s1 + $0x1080] sm:$0xf]
  %v1164 = vld [vmem:[%s1 + $0x1084] sm:$0xf]
  %v1165 = vld [vmem:[%s1 + $0x1088] sm:$0xf]
  %v1166 = vld [vmem:[%s1 + $0x108c] sm:$0xf]
  %v1167 = vld [vmem:[%s1 + $0x1090] sm:$0xf]
  %v1168 = vld [vmem:[%s1 + $0x1094] sm:$0xf]
  %v1169 = vld [vmem:[%s1 + $0x1098] sm:$0xf]
  %v1170 = vld [vmem:[%s1 + $0x109c] sm:$0xf]
  %v1171 = vld [vmem:[%s1 + $0x10a0] sm:$0xf]
  %v1172 = vld [vmem:[%s1 + $0x10a4] sm:$0xf]
  %v1173 = vld [vmem:[%s1 + $0x10a8] sm:$0xf]
  %v1174 = vld [vmem:[%s1 + $0x10ac] sm:$0xf]
  %v1175 = vld [vmem:[%s1 + $0x10b0] sm:$0xf]
  %v1176 = vld [vmem:[%s1 + $0x10b4] sm:$0xf]
  %v1177 = vld [vmem:[%s1 + $0x10b8] sm:$0xf]
  %v1178 = vld [vmem:[%s1 + $0x10bc] sm:$0xf]
  %v1179 = vld [vmem:[%s1 + $0x10c0] sm:$0xf]
  %v1180 = vld [vmem:[%s1 + $0x10c4] sm:$0xf]
  %v1181 = vld [vmem:[%s1 + $0x10c8] sm:$0xf]
  %v1182 = vld [vmem:[%s1 + $0x10cc] sm:$0xf]
  %v1183 = vld [vmem:[%s1 + $0x10d0] sm:$0xf]
  %v1184 = vld [vmem:[%s1 + $0x10d4] sm:$0xf]
  %v1185 = vld [vmem:[%s1 + $0x10d8] sm:$0xf]
  %v1186 = vld [vmem:[%s1 + $0x10dc] sm:$0xf]
  %v1187 = vld [vmem:[%s1 + $0x10e0] sm:$0xf]
  %v1188 = vld [vmem:[%s1 + $0x10e4] sm:$0xf]
  %v1189 = vld [vmem:[%s1 + $0x10e8] sm:$0xf]
  %v1190 = vld [vmem:[%s1 + $0x10ec] sm:$0xf]
  %v1191 = vld [vmem:[%s1 + $0x10f0] sm:$0xf]
  %v1192 = vld [vmem:[%s1 + $0x10f4] sm:$0xf]
  %v1193 = vld [vmem:[%s1 + $0x10f8] sm:$0xf]
  %v1194 = vld [vmem:[%s1 + $0x10fc] sm:$0xf]
  %v1195 = vld [vmem:[%s1 + $0x1100] sm:$0xf]
  %v1196 = vld [vmem:[%s1 + $0x1104] sm:$0xf]
  %v1197 = vld [vmem:[%s1 + $0x1108] sm:$0xf]
  %v1198 = vld [vmem:[%s1 + $0x110c] sm:$0xf]
  %v1199 = vld [vmem:[%s1 + $0x1110] sm:$0xf]
  %v1200 = vld [vmem:[%s1 + $0x1114] sm:$0xf]
  %v1201 = vld [vmem:[%s1 + $0x1118] sm:$0xf]
  %v1202 = vld [vmem:[%s1 + $0x111c] sm:$0xf]
  %v1203 = vld [vmem:[%s1 + $0x1120] sm:$0xf]
  %v1204 = vld [vmem:[%s1 + $0x1124] sm:$0xf]
  %v1205 = vld [vmem:[%s1 + $0x1128] sm:$0xf]
  %v1206 = vld [vmem:[%s1 + $0x112c] sm:$0xf]
  %v1207 = vld [vmem:[%s1 + $0x1130] sm:$0xf]
  %v1208 = vld [vmem:[%s1 + $0x1134] sm:$0xf]
  %v1209 = vld [vmem:[%s1 + $0x1138] sm:$0xf]
  %v1210 = vld [vmem:[%s1 + $0x113c] sm:$0xf]
  %v1211 = vld [vmem:[%s1 + $0x1140] sm:$0xf]
  %v1212 = vld [vmem:[%s1 + $0x1144] sm:$0xf]
  %v1213 = vld [vmem:[%s1 + $0x1148] sm:$0xf]
  %v1214 = vld [vmem:[%s1 + $0x114c] sm:$0xf]
  %v1215 = vld [vmem:[%s1 + $0x1150] sm:$0xf]
  %v1216 = vld [vmem:[%s1 + $0x1154] sm:$0xf]
  %v1217 = vld [vmem:[%s1 + $0x1158] sm:$0xf]
  %v1218 = vld [vmem:[%s1 + $0x115c] sm:$0xf]
  %v1219 = vld [vmem:[%s1 + $0x1160] sm:$0xf]
  %v1220 = vld [vmem:[%s1 + $0x1164] sm:$0xf]
  %v1221 = vld [vmem:[%s1 + $0x1168] sm:$0xf]
  %v1222 = vld [vmem:[%s1 + $0x116c] sm:$0xf]
  %v1223 = vld [vmem:[%s1 + $0x1170] sm:$0xf]
  %v1224 = vld [vmem:[%s1 + $0x1174] sm:$0xf]
  %v1225 = vld [vmem:[%s1 + $0x1178] sm:$0xf]
  %v1226 = vld [vmem:[%s1 + $0x117c] sm:$0xf]
  %v1227 = vld [vmem:[%s1 + $0x1180] sm:$0xf]
  %v1228 = vld [vmem:[%s1 + $0x1184] sm:$0xf]
  %v1229 = vld [vmem:[%s1 + $0x1188] sm:$0xf]
  %v1230 = vld [vmem:[%s1 + $0x118c] sm:$0xf]
  %v1231 = vld [vmem:[%s1 + $0x1190] sm:$0xf]
  %v1232 = vld [vmem:[%s1 + $0x1194] sm:$0xf]
  %v1233 = vld [vmem:[%s1 + $0x1198] sm:$0xf]
  %v1234 = vld [vmem:[%s1 + $0x119c] sm:$0xf]
  %v1235 = vld [vmem:[%s1 + $0x11a0] sm:$0xf]
  %v1236 = vld [vmem:[%s1 + $0x11a4] sm:$0xf]
  %v1237 = vld [vmem:[%s1 + $0x11a8] sm:$0xf]
  %v1238 = vld [vmem:[%s1 + $0x11ac] sm:$0xf]
  %v1239 = vld [vmem:[%s1 + $0x11b0] sm:$0xf]
  %v1240 = vld [vmem:[%s1 + $0x11b4] sm:$0xf]
  %v1241 = vld [vmem:[%s1 + $0x11b8] sm:$0xf]
  %v1242 = vld [vmem:[%s1 + $0x11bc] sm:$0xf]
  %v1243 = vld [vmem:[%s1 + $0x11c0] sm:$0xf]
  %v1244 = vld [vmem:[%s1 + $0x11c4] sm:$0xf]
  %v1245 = vld [vmem:[%s1 + $0x11c8] sm:$0xf]
  %v1246 = vld [vmem:[%s1 + $0x11cc] sm:$0xf]
  %v1247 = vld [vmem:[%s1 + $0x11d0] sm:$0xf]
  %v1248 = vld [vmem:[%s1 + $0x11d4] sm:$0xf]
  %v1249 = vld [vmem:[%s1 + $0x11d8] sm:$0xf]
  %v1250 = vld [vmem:[%s1 + $0x11dc] sm:$0xf]
  %v1251 = vld [vmem:[%s1 + $0x11e0] sm:$0xf]
  %v1252 = vld [vmem:[%s1 + $0x11e4] sm:$0xf]
  %v1253 = vld [vmem:[%s1 + $0x11e8] sm:$0xf]
  %v1254 = vld [vmem:[%s1 + $0x11ec] sm:$0xf]
  %v1255 = vld [vmem:[%s1 + $0x11f0] sm:$0xf]
  %v1256 = vld [vmem:[%s1 + $0x11f4] sm:$0xf]
  %v1257 = vld [vmem:[%s1 + $0x11f8] sm:$0xf]
  %v1258 = vld [vmem:[%s1 + $0x11fc] sm:$0xf]
  %v1259 = vld [vmem:[%s1 + $0x1200] sm:$0xf]
  %v1260 = vld [vmem:[%s1 + $0x1204] sm:$0xf]
  %v1261 = vld [vmem:[%s1 + $0x1208] sm:$0xf]
  %v1262 = vld [vmem:[%s1 + $0x120c] sm:$0xf]
  %v1263 = vld [vmem:[%s1 + $0x1210] sm:$0xf]
  %v1264 = vld [vmem:[%s1 + $0x1214] sm:$0xf]
  %v1265 = vld [vmem:[%s1 + $0x1218] sm:$0xf]
  %v1266 = vld [vmem:[%s1 + $0x121c] sm:$0xf]
  %v1267 = vld [vmem:[%s1 + $0x1220] sm:$0xf]
  %v1268 = vld [vmem:[%s1 + $0x1224] sm:$0xf]
  %v1269 = vld [vmem:[%s1 + $0x1228] sm:$0xf]
  %v1270 = vld [vmem:[%s1 + $0x122c] sm:$0xf]
  %v1271 = vld [vmem:[%s1 + $0x1230] sm:$0xf]
  %v1272 = vld [vmem:[%s1 + $0x1234] sm:$0xf]
  %v1273 = vld [vmem:[%s1 + $0x1238] sm:$0xf]
  %v1274 = vld [vmem:[%s1 + $0x123c] sm:$0xf]
  %v1275 = vld [vmem:[%s1 + $0x1240] sm:$0xf]
  %v1276 = vld [vmem:[%s1 + $0x1244] sm:$0xf]
  %v1277 = vld [vmem:[%s1 + $0x1248] sm:$0xf]
  %v1278 = vld [vmem:[%s1 + $0x124c] sm:$0xf]
  %v1279 = vld [vmem:[%s1 + $0x1250] sm:$0xf]
  %v1280 = vld [vmem:[%s1 + $0x1254] sm:$0xf]
  %v1281 = vld [vmem:[%s1 + $0x1258] sm:$0xf]
  %v1282 = vld [vmem:[%s1 + $0x125c] sm:$0xf]
  %v1283 = vld [vmem:[%s1 + $0x1260] sm:$0xf]
  %v1284 = vld [vmem:[%s1 + $0x1264] sm:$0xf]
  %v1285 = vld [vmem:[%s1 + $0x1268] sm:$0xf]
  %v1286 = vld [vmem:[%s1 + $0x126c] sm:$0xf]
  %v1287 = vld [vmem:[%s1 + $0x1270] sm:$0xf]
  %v1288 = vld [vmem:[%s1 + $0x1274] sm:$0xf]
  %v1289 = vld [vmem:[%s1 + $0x1278] sm:$0xf]
  %v1290 = vld [vmem:[%s1 + $0x127c] sm:$0xf]
  %v1291 = vld [vmem:[%s1 + $0x1280] sm:$0xf]
  %v1292 = vld [vmem:[%s1 + $0x1284] sm:$0xf]
  %v1293 = vld [vmem:[%s1 + $0x1288] sm:$0xf]
  %v1294 = vld [vmem:[%s1 + $0x128c] sm:$0xf]
  %v1295 = vld [vmem:[%s1 + $0x1290] sm:$0xf]
  %v1296 = vld [vmem:[%s1 + $0x1294] sm:$0xf]
  %v1297 = vld [vmem:[%s1 + $0x1298] sm:$0xf]
  %v1298 = vld [vmem:[%s1 + $0x129c] sm:$0xf]
  %v1299 = vld [vmem:[%s1 + $0x12a0] sm:$0xf]
  %v1300 = vld [vmem:[%s1 + $0x12a4] sm:$0xf]
  %v1301 = vld [vmem:[%s1 + $0x12a8] sm:$0xf]
  %v1302 = vld [vmem:[%s1 + $0x12ac] sm:$0xf]
  %v1303 = vld [vmem:[%s1 + $0x12b0] sm:$0xf]
  %v1304 = vld [vmem:[%s1 + $0x12b4] sm:$0xf]
  %v1305 = vld [vmem:[%s1 + $0x12b8] sm:$0xf]
  %v1306 = vld [vmem:[%s1 + $0x12bc] sm:$0xf]
  %v1307 = vld [vmem:[%s1 + $0x12c0] sm:$0xf]
  %v1308 = vld [vmem:[%s1 + $0x12c4] sm:$0xf]
  %v1309 = vld [vmem:[%s1 + $0x12c8] sm:$0xf]
  %v1310 = vld [vmem:[%s1 + $0x12cc] sm:$0xf]
  %v1311 = vld [vmem:[%s1 + $0x12d0] sm:$0xf]
  %v1312 = vld [vmem:[%s1 + $0x12d4] sm:$0xf]
  %v1313 = vld [vmem:[%s1 + $0x12d8] sm:$0xf]
  %v1314 = vld [vmem:[%s1 + $0x12dc] sm:$0xf]
  %v1315 = vld [vmem:[%s1 + $0x12e0] sm:$0xf]
  %v1316 = vld [vmem:[%s1 + $0x12e4] sm:$0xf]
  %v1317 = vld [vmem:[%s1 + $0x12e8] sm:$0xf]
  %v1318 = vld [vmem:[%s1 + $0x12ec] sm:$0xf]
  %v1319 = vld [vmem:[%s1 + $0x12f0] sm:$0xf]
  %v1320 = vld [vmem:[%s1 + $0x12f4] sm:$0xf]
  %v1321 = vld [vmem:[%s1 + $0x12f8] sm:$0xf]
  %v1322 = vld [vmem:[%s1 + $0x12fc] sm:$0xf]
  %v1323 = vld [vmem:[%s1 + $0x1300] sm:$0xf]
  %v1324 = vld [vmem:[%s1 + $0x1304] sm:$0xf]
  %v1325 = vld [vmem:[%s1 + $0x1308] sm:$0xf]
  %v1326 = vld [vmem:[%s1 + $0x130c] sm:$0xf]
  %v1327 = vld [vmem:[%s1 + $0x1310] sm:$0xf]
  %v1328 = vld [vmem:[%s1 + $0x1314] sm:$0xf]
  %v1329 = vld [vmem:[%s1 + $0x1318] sm:$0xf]
  %v1330 = vld [vmem:[%s1 + $0x131c] sm:$0xf]
  %v1331 = vld [vmem:[%s1 + $0x1320] sm:$0xf]
  %v1332 = vld [vmem:[%s1 + $0x1324] sm:$0xf]
  %v1333 = vld [vmem:[%s1 + $0x1328] sm:$0xf]
  %v1334 = vld [vmem:[%s1 + $0x132c] sm:$0xf]
  %v1335 = vld [vmem:[%s1 + $0x1330] sm:$0xf]
  %v1336 = vld [vmem:[%s1 + $0x1334] sm:$0xf]
  %v1337 = vld [vmem:[%s1 + $0x1338] sm:$0xf]
  %v1338 = vld [vmem:[%s1 + $0x133c] sm:$0xf]
  %v1339 = vld [vmem:[%s1 + $0x1340] sm:$0xf]
  %v1340 = vld [vmem:[%s1 + $0x1344] sm:$0xf]
  %v1341 = vld [vmem:[%s1 + $0x1348] sm:$0xf]
  %v1342 = vld [vmem:[%s1 + $0x134c] sm:$0xf]
  %v1343 = vld [vmem:[%s1 + $0x1350] sm:$0xf]
  %v1344 = vld [vmem:[%s1 + $0x1354] sm:$0xf]
  %v1345 = vld [vmem:[%s1 + $0x1358] sm:$0xf]
  %v1346 = vld [vmem:[%s1 + $0x135c] sm:$0xf]
  %v1347 = vld [vmem:[%s1 + $0x1360] sm:$0xf]
  %v1348 = vld [vmem:[%s1 + $0x1364] sm:$0xf]
  %v1349 = vld [vmem:[%s1 + $0x1368] sm:$0xf]
  %v1350 = vld [vmem:[%s1 + $0x136c] sm:$0xf]
  %v1351 = vld [vmem:[%s1 + $0x1370] sm:$0xf]
  %v1352 = vld [vmem:[%s1 + $0x1374] sm:$0xf]
  %v1353 = vld [vmem:[%s1 + $0x1378] sm:$0xf]
  %v1354 = vld [vmem:[%s1 + $0x137c] sm:$0xf]
  %v1355 = vld [vmem:[%s1 + $0x1380] sm:$0xf]
  %v1356 = vld [vmem:[%s1 + $0x1384] sm:$0xf]
  %v1357 = vld [vmem:[%s1 + $0x1388] sm:$0xf]
  %v1358 = vld [vmem:[%s1 + $0x138c] sm:$0xf]
  %v1359 = vld [vmem:[%s1 + $0x1390] sm:$0xf]
  %v1360 = vld [vmem:[%s1 + $0x1394] sm:$0xf]
  %v1361 = vld [vmem:[%s1 + $0x1398] sm:$0xf]
  %v1362 = vld [vmem:[%s1 + $0x139c] sm:$0xf]
  %v1363 = vld [vmem:[%s1 + $0x13a0] sm:$0xf]
  %v1364 = vld [vmem:[%s1 + $0x13a4] sm:$0xf]
  %v1365 = vld [vmem:[%s1 + $0x13a8] sm:$0xf]
  %v1366 = vld [vmem:[%s1 + $0x13ac] sm:$0xf]
  %v1367 = vld [vmem:[%s1 + $0x13b0] sm:$0xf]
  %v1368 = vld [vmem:[%s1 + $0x13b4] sm:$0xf]
  %v1369 = vld [vmem:[%s1 + $0x13b8] sm:$0xf]
  %v1370 = vld [vmem:[%s1 + $0x13bc] sm:$0xf]
  %v1371 = vld [vmem:[%s1 + $0x13c0] sm:$0xf]
  %v1372 = vld [vmem:[%s1 + $0x13c4] sm:$0xf]
  %v1373 = vld [vmem:[%s1 + $0x13c8] sm:$0xf]
  %v1374 = vld [vmem:[%s1 + $0x13cc] sm:$0xf]
  %v1375 = vld [vmem:[%s1 + $0x13d0] sm:$0xf]
  %v1376 = vld [vmem:[%s1 + $0x13d4] sm:$0xf]
  %v1377 = vld [vmem:[%s1 + $0x13d8] sm:$0xf]
  %v1378 = vld [vmem:[%s1 + $0x13dc] sm:$0xf]
  %v1379 = vld [vmem:[%s1 + $0x13e0] sm:$0xf]
  %v1380 = vld [vmem:[%s1 + $0x13e4] sm:$0xf]
  %v1381 = vld [vmem:[%s1 + $0x13e8] sm:$0xf]
  %v1382 = vld [vmem:[%s1 + $0x13ec] sm:$0xf]
  %v1383 = vld [vmem:[%s1 + $0x13f0] sm:$0xf]
  %v1384 = vld [vmem:[%s1 + $0x13f4] sm:$0xf]
  %v1385 = vld [vmem:[%s1 + $0x13f8] sm:$0xf]
  %v1386 = vld [vmem:[%s1 + $0x13fc] sm:$0xf]
  %v1387 = vld [vmem:[%s2] sm:$0x1]
  %v1389 = vlaneseq
  %v1390 = vshrl.u32 %v1389, 7
  %v1391 = vsub.s32 0, %v1390
  %v1392 = vrot.slane %v1387, %v1391
  %v1474 = vunpack.c.l.b16 %v27
  %v1475 = vunpack.c.h.b16 %v27
  %v1476 = vunpack.c.l.b16 %v28
  %v1477 = vunpack.c.h.b16 %v28
  %v1478 = vunpack.c.l.b16 %v29
  %v1479 = vunpack.c.h.b16 %v29
  %v1480 = vunpack.c.l.b16 %v30
  %v1481 = vunpack.c.h.b16 %v30
  %v1482 = vunpack.c.l.b16 %v31
  %v1483 = vunpack.c.h.b16 %v31
  %v1484 = vunpack.c.l.b16 %v32
  %v1485 = vunpack.c.h.b16 %v32
  %v1486 = vunpack.c.l.b16 %v33
  %v1487 = vunpack.c.h.b16 %v33
  %v1488 = vunpack.c.l.b16 %v34
  %v1489 = vunpack.c.h.b16 %v34
  %v1490 = vunpack.c.l.b16 %v35
  %v1491 = vunpack.c.h.b16 %v35
  %v1492 = vunpack.c.l.b16 %v36
  %v1493 = vunpack.c.h.b16 %v36
  %v1494 = vunpack.c.l.b16 %v37
  %v1495 = vunpack.c.h.b16 %v37
  %v1496 = vunpack.c.l.b16 %v38
  %v1497 = vunpack.c.h.b16 %v38
  %v1498 = vunpack.c.l.b16 %v39
  %v1499 = vunpack.c.h.b16 %v39
  %v1500 = vunpack.c.l.b16 %v40
  %v1501 = vunpack.c.h.b16 %v40
  %v1502 = vunpack.c.l.b16 %v41
  %v1503 = vunpack.c.h.b16 %v41
  %v1504 = vunpack.c.l.b16 %v42
  %v1505 = vunpack.c.h.b16 %v42
  %v1506 = vunpack.c.l.b16 %v43
  %v1507 = vunpack.c.h.b16 %v43
  %v1508 = vunpack.c.l.b16 %v44
  %v1509 = vunpack.c.h.b16 %v44
  %v1510 = vunpack.c.l.b16 %v45
  %v1511 = vunpack.c.h.b16 %v45
  %v1512 = vunpack.c.l.b16 %v46
  %v1513 = vunpack.c.h.b16 %v46
  %v1514 = vunpack.c.l.b16 %v47
  %v1515 = vunpack.c.h.b16 %v47
  %v1516 = vunpack.c.l.b16 %v48
  %v1517 = vunpack.c.h.b16 %v48
  %v1518 = vunpack.c.l.b16 %v49
  %v1519 = vunpack.c.h.b16 %v49
  %v1520 = vunpack.c.l.b16 %v50
  %v1521 = vunpack.c.h.b16 %v50
  %v1522 = vunpack.c.l.b16 %v51
  %v1523 = vunpack.c.h.b16 %v51
  %v1524 = vunpack.c.l.b16 %v52
  %v1525 = vunpack.c.h.b16 %v52
  %v1526 = vunpack.c.l.b16 %v53
  %v1527 = vunpack.c.h.b16 %v53
  %v1528 = vunpack.c.l.b16 %v54
  %v1529 = vunpack.c.h.b16 %v54
  %v1530 = vunpack.c.l.b16 %v55
  %v1531 = vunpack.c.h.b16 %v55
  %v1532 = vunpack.c.l.b16 %v56
  %v1533 = vunpack.c.h.b16 %v56
  %v1534 = vunpack.c.l.b16 %v57
  %v1535 = vunpack.c.h.b16 %v57
  %v1536 = vunpack.c.l.b16 %v58
  %v1537 = vunpack.c.h.b16 %v58
  %v1538 = vunpack.c.l.b16 %v59
  %v1539 = vunpack.c.h.b16 %v59
  %v1540 = vunpack.c.l.b16 %v60
  %v1541 = vunpack.c.h.b16 %v60
  %v1542 = vunpack.c.l.b16 %v61
  %v1543 = vunpack.c.h.b16 %v61
  %v1544 = vunpack.c.l.b16 %v62
  %v1545 = vunpack.c.h.b16 %v62
  %v1546 = vunpack.c.l.b16 %v63
  %v1547 = vunpack.c.h.b16 %v63
  %v1548 = vunpack.c.l.b16 %v64
  %v1549 = vunpack.c.h.b16 %v64
  %v1550 = vunpack.c.l.b16 %v65
  %v1551 = vunpack.c.h.b16 %v65
  %v1552 = vunpack.c.l.b16 %v66
  %v1553 = vunpack.c.h.b16 %v66
  %v1554 = vunpack.c.l.b16 %v67
  %v1555 = vunpack.c.h.b16 %v67
  %v1556 = vunpack.c.l.b16 %v68
  %v1557 = vunpack.c.h.b16 %v68
  %v1558 = vunpack.c.l.b16 %v69
  %v1559 = vunpack.c.h.b16 %v69
  %v1560 = vunpack.c.l.b16 %v70
  %v1561 = vunpack.c.h.b16 %v70
  %v1562 = vunpack.c.l.b16 %v71
  %v1563 = vunpack.c.h.b16 %v71
  %v1564 = vunpack.c.l.b16 %v72
  %v1565 = vunpack.c.h.b16 %v72
  %v1566 = vunpack.c.l.b16 %v73
  %v1567 = vunpack.c.h.b16 %v73
  %v1568 = vunpack.c.l.b16 %v74
  %v1569 = vunpack.c.h.b16 %v74
  %v1570 = vunpack.c.l.b16 %v75
  %v1571 = vunpack.c.h.b16 %v75
  %v1572 = vunpack.c.l.b16 %v76
  %v1573 = vunpack.c.h.b16 %v76
  %v1574 = vunpack.c.l.b16 %v77
  %v1575 = vunpack.c.h.b16 %v77
  %v1576 = vunpack.c.l.b16 %v78
  %v1577 = vunpack.c.h.b16 %v78
  %v1578 = vunpack.c.l.b16 %v79
  %v1579 = vunpack.c.h.b16 %v79
  %v1580 = vunpack.c.l.b16 %v80
  %v1581 = vunpack.c.h.b16 %v80
  %v1582 = vunpack.c.l.b16 %v81
  %v1583 = vunpack.c.h.b16 %v81
  %v1584 = vunpack.c.l.b16 %v82
  %v1585 = vunpack.c.h.b16 %v82
  %v1586 = vunpack.c.l.b16 %v83
  %v1587 = vunpack.c.h.b16 %v83
  %v1588 = vunpack.c.l.b16 %v84
  %v1589 = vunpack.c.h.b16 %v84
  %v1590 = vunpack.c.l.b16 %v85
  %v1591 = vunpack.c.h.b16 %v85
  %v1592 = vunpack.c.l.b16 %v86
  %v1593 = vunpack.c.h.b16 %v86
  %v1594 = vunpack.c.l.b16 %v87
  %v1595 = vunpack.c.h.b16 %v87
  %v1596 = vunpack.c.l.b16 %v88
  %v1597 = vunpack.c.h.b16 %v88
  %v1598 = vunpack.c.l.b16 %v89
  %v1599 = vunpack.c.h.b16 %v89
  %v1600 = vunpack.c.l.b16 %v90
  %v1601 = vunpack.c.h.b16 %v90
  %v1602 = vunpack.c.l.b16 %v91
  %v1603 = vunpack.c.h.b16 %v91
  %v1604 = vunpack.c.l.b16 %v92
  %v1605 = vunpack.c.h.b16 %v92
  %v1606 = vunpack.c.l.b16 %v93
  %v1607 = vunpack.c.h.b16 %v93
  %v1608 = vunpack.c.l.b16 %v94
  %v1609 = vunpack.c.h.b16 %v94
  %v1610 = vunpack.c.l.b16 %v95
  %v1611 = vunpack.c.h.b16 %v95
  %v1612 = vunpack.c.l.b16 %v96
  %v1613 = vunpack.c.h.b16 %v96
  %v1614 = vunpack.c.l.b16 %v97
  %v1615 = vunpack.c.h.b16 %v97
  %v1616 = vunpack.c.l.b16 %v98
  %v1617 = vunpack.c.h.b16 %v98
  %v1618 = vunpack.c.l.b16 %v99
  %v1619 = vunpack.c.h.b16 %v99
  %v1620 = vunpack.c.l.b16 %v100
  %v1621 = vunpack.c.h.b16 %v100
  %v1622 = vunpack.c.l.b16 %v101
  %v1623 = vunpack.c.h.b16 %v101
  %v1624 = vunpack.c.l.b16 %v102
  %v1625 = vunpack.c.h.b16 %v102
  %v1626 = vunpack.c.l.b16 %v103
  %v1627 = vunpack.c.h.b16 %v103
  %v1628 = vunpack.c.l.b16 %v104
  %v1629 = vunpack.c.h.b16 %v104
  %v1630 = vunpack.c.l.b16 %v105
  %v1631 = vunpack.c.h.b16 %v105
  %v1632 = vunpack.c.l.b16 %v106
  %v1633 = vunpack.c.h.b16 %v106
  %v1634 = vpack.c.b16 %v1554, %v1474
  %v1635 = vpack.c.b16 %v1555, %v1475
  %v1636 = vpack.c.b16 %v1556, %v1476
  %v1637 = vpack.c.b16 %v1557, %v1477
  %v1638 = vpack.c.b16 %v1558, %v1478
  %v1639 = vpack.c.b16 %v1559, %v1479
  %v1640 = vpack.c.b16 %v1560, %v1480
  %v1641 = vpack.c.b16 %v1561, %v1481
  %v1642 = vpack.c.b16 %v1562, %v1482
  %v1643 = vpack.c.b16 %v1563, %v1483
  %v1644 = vpack.c.b16 %v1564, %v1484
  %v1645 = vpack.c.b16 %v1565, %v1485
  %v1646 = vpack.c.b16 %v1566, %v1486
  %v1647 = vpack.c.b16 %v1567, %v1487
  %v1648 = vpack.c.b16 %v1568, %v1488
  %v1649 = vpack.c.b16 %v1569, %v1489
  %v1650 = vpack.c.b16 %v1570, %v1490
  %v1651 = vpack.c.b16 %v1571, %v1491
  %v1652 = vpack.c.b16 %v1572, %v1492
  %v1653 = vpack.c.b16 %v1573, %v1493
  %v1654 = vpack.c.b16 %v1574, %v1494
  %v1655 = vpack.c.b16 %v1575, %v1495
  %v1656 = vpack.c.b16 %v1576, %v1496
  %v1657 = vpack.c.b16 %v1577, %v1497
  %v1658 = vpack.c.b16 %v1578, %v1498
  %v1659 = vpack.c.b16 %v1579, %v1499
  %v1660 = vpack.c.b16 %v1580, %v1500
  %v1661 = vpack.c.b16 %v1581, %v1501
  %v1662 = vpack.c.b16 %v1582, %v1502
  %v1663 = vpack.c.b16 %v1583, %v1503
  %v1664 = vpack.c.b16 %v1584, %v1504
  %v1665 = vpack.c.b16 %v1585, %v1505
  %v1666 = vpack.c.b16 %v1586, %v1506
  %v1667 = vpack.c.b16 %v1587, %v1507
  %v1668 = vpack.c.b16 %v1588, %v1508
  %v1669 = vpack.c.b16 %v1589, %v1509
  %v1670 = vpack.c.b16 %v1590, %v1510
  %v1671 = vpack.c.b16 %v1591, %v1511
  %v1672 = vpack.c.b16 %v1592, %v1512
  %v1673 = vpack.c.b16 %v1593, %v1513
  %v1674 = vpack.c.b16 %v1594, %v1514
  %v1675 = vpack.c.b16 %v1595, %v1515
  %v1676 = vpack.c.b16 %v1596, %v1516
  %v1677 = vpack.c.b16 %v1597, %v1517
  %v1678 = vpack.c.b16 %v1598, %v1518
  %v1679 = vpack.c.b16 %v1599, %v1519
  %v1680 = vpack.c.b16 %v1600, %v1520
  %v1681 = vpack.c.b16 %v1601, %v1521
  %v1682 = vpack.c.b16 %v1602, %v1522
  %v1683 = vpack.c.b16 %v1603, %v1523
  %v1684 = vpack.c.b16 %v1604, %v1524
  %v1685 = vpack.c.b16 %v1605, %v1525
  %v1686 = vpack.c.b16 %v1606, %v1526
  %v1687 = vpack.c.b16 %v1607, %v1527
  %v1688 = vpack.c.b16 %v1608, %v1528
  %v1689 = vpack.c.b16 %v1609, %v1529
  %v1690 = vpack.c.b16 %v1610, %v1530
  %v1691 = vpack.c.b16 %v1611, %v1531
  %v1692 = vpack.c.b16 %v1612, %v1532
  %v1693 = vpack.c.b16 %v1613, %v1533
  %v1694 = vpack.c.b16 %v1614, %v1534
  %v1695 = vpack.c.b16 %v1615, %v1535
  %v1696 = vpack.c.b16 %v1616, %v1536
  %v1697 = vpack.c.b16 %v1617, %v1537
  %v1698 = vpack.c.b16 %v1618, %v1538
  %v1699 = vpack.c.b16 %v1619, %v1539
  %v1700 = vpack.c.b16 %v1620, %v1540
  %v1701 = vpack.c.b16 %v1621, %v1541
  %v1702 = vpack.c.b16 %v1622, %v1542
  %v1703 = vpack.c.b16 %v1623, %v1543
  %v1704 = vpack.c.b16 %v1624, %v1544
  %v1705 = vpack.c.b16 %v1625, %v1545
  %v1706 = vpack.c.b16 %v1626, %v1546
  %v1707 = vpack.c.b16 %v1627, %v1547
  %v1708 = vpack.c.b16 %v1628, %v1548
  %v1709 = vpack.c.b16 %v1629, %v1549
  %v1710 = vpack.c.b16 %v1630, %v1550
  %v1711 = vpack.c.b16 %v1631, %v1551
  %v1712 = vpack.c.b16 %v1632, %v1552
  %v1713 = vpack.c.b16 %v1633, %v1553
  %v3074 = vunpack.c.l.b16 %v107
  %v3075 = vunpack.c.l.b16 %v108
  %v3076 = vunpack.c.l.b16 %v109
  %v3077 = vunpack.c.l.b16 %v110
  %v3078 = vunpack.c.l.b16 %v111
  %v3079 = vunpack.c.l.b16 %v112
  %v3080 = vunpack.c.l.b16 %v113
  %v3081 = vunpack.c.l.b16 %v114
  %v3082 = vunpack.c.l.b16 %v115
  %v3083 = vunpack.c.l.b16 %v116
  %v3084 = vunpack.c.l.b16 %v117
  %v3085 = vunpack.c.l.b16 %v118
  %v3086 = vunpack.c.l.b16 %v119
  %v3087 = vunpack.c.l.b16 %v120
  %v3088 = vunpack.c.l.b16 %v121
  %v3089 = vunpack.c.l.b16 %v122
  %v3090 = vunpack.c.l.b16 %v123
  %v3091 = vunpack.c.l.b16 %v124
  %v3092 = vunpack.c.l.b16 %v125
  %v3093 = vunpack.c.l.b16 %v126
  %v3094 = vunpack.c.l.b16 %v127
  %v3095 = vunpack.c.l.b16 %v128
  %v3096 = vunpack.c.l.b16 %v129
  %v3097 = vunpack.c.l.b16 %v130
  %v3098 = vunpack.c.l.b16 %v131
  %v3099 = vunpack.c.l.b16 %v132
  %v3100 = vunpack.c.l.b16 %v133
  %v3101 = vunpack.c.l.b16 %v134
  %v3102 = vunpack.c.l.b16 %v135
  %v3103 = vunpack.c.l.b16 %v136
  %v3104 = vunpack.c.l.b16 %v137
  %v3105 = vunpack.c.l.b16 %v138
  %v3106 = vunpack.c.l.b16 %v139
  %v3107 = vunpack.c.l.b16 %v140
  %v3108 = vunpack.c.l.b16 %v141
  %v3109 = vunpack.c.l.b16 %v142
  %v3110 = vunpack.c.l.b16 %v143
  %v3111 = vunpack.c.l.b16 %v144
  %v3112 = vunpack.c.l.b16 %v145
  %v3113 = vunpack.c.l.b16 %v146
  %v3114 = vunpack.c.l.b16 %v147
  %v3115 = vunpack.c.l.b16 %v148
  %v3116 = vunpack.c.l.b16 %v149
  %v3117 = vunpack.c.l.b16 %v150
  %v3118 = vunpack.c.l.b16 %v151
  %v3119 = vunpack.c.l.b16 %v152
  %v3120 = vunpack.c.l.b16 %v153
  %v3121 = vunpack.c.l.b16 %v154
  %v3122 = vunpack.c.l.b16 %v155
  %v3123 = vunpack.c.l.b16 %v156
  %v3124 = vunpack.c.l.b16 %v157
  %v3125 = vunpack.c.l.b16 %v158
  %v3126 = vunpack.c.l.b16 %v159
  %v3127 = vunpack.c.l.b16 %v160
  %v3128 = vunpack.c.l.b16 %v161
  %v3129 = vunpack.c.l.b16 %v162
  %v3130 = vunpack.c.l.b16 %v163
  %v3131 = vunpack.c.l.b16 %v164
  %v3132 = vunpack.c.l.b16 %v165
  %v3133 = vunpack.c.l.b16 %v166
  %v3134 = vunpack.c.l.b16 %v167
  %v3135 = vunpack.c.l.b16 %v168
  %v3136 = vunpack.c.l.b16 %v169
  %v3137 = vunpack.c.l.b16 %v170
  %v3138 = vunpack.c.l.b16 %v171
  %v3139 = vunpack.c.l.b16 %v172
  %v3140 = vunpack.c.l.b16 %v173
  %v3141 = vunpack.c.l.b16 %v174
  %v3142 = vunpack.c.l.b16 %v175
  %v3143 = vunpack.c.l.b16 %v176
  %v3144 = vunpack.c.l.b16 %v177
  %v3145 = vunpack.c.l.b16 %v178
  %v3146 = vunpack.c.l.b16 %v179
  %v3147 = vunpack.c.l.b16 %v180
  %v3148 = vunpack.c.l.b16 %v181
  %v3149 = vunpack.c.l.b16 %v182
  %v3150 = vunpack.c.l.b16 %v183
  %v3151 = vunpack.c.l.b16 %v184
  %v3152 = vunpack.c.l.b16 %v185
  %v3153 = vunpack.c.l.b16 %v186
  %v3154 = vunpack.c.l.b16 %v187
  %v3155 = vunpack.c.l.b16 %v188
  %v3156 = vunpack.c.l.b16 %v189
  %v3157 = vunpack.c.l.b16 %v190
  %v3158 = vunpack.c.l.b16 %v191
  %v3159 = vunpack.c.l.b16 %v192
  %v3160 = vunpack.c.l.b16 %v193
  %v3161 = vunpack.c.l.b16 %v194
  %v3162 = vunpack.c.l.b16 %v195
  %v3163 = vunpack.c.l.b16 %v196
  %v3164 = vunpack.c.l.b16 %v197
  %v3165 = vunpack.c.l.b16 %v198
  %v3166 = vunpack.c.l.b16 %v199
  %v3167 = vunpack.c.l.b16 %v200
  %v3168 = vunpack.c.l.b16 %v201
  %v3169 = vunpack.c.l.b16 %v202
  %v3170 = vunpack.c.l.b16 %v203
  %v3171 = vunpack.c.l.b16 %v204
  %v3172 = vunpack.c.l.b16 %v205
  %v3173 = vunpack.c.l.b16 %v206
  %v3174 = vunpack.c.l.b16 %v207
  %v3175 = vunpack.c.l.b16 %v208
  %v3176 = vunpack.c.l.b16 %v209
  %v3177 = vunpack.c.l.b16 %v210
  %v3178 = vunpack.c.l.b16 %v211
  %v3179 = vunpack.c.l.b16 %v212
  %v3180 = vunpack.c.l.b16 %v213
  %v3181 = vunpack.c.l.b16 %v214
  %v3182 = vunpack.c.l.b16 %v215
  %v3183 = vunpack.c.l.b16 %v216
  %v3184 = vunpack.c.l.b16 %v217
  %v3185 = vunpack.c.l.b16 %v218
  %v3186 = vunpack.c.l.b16 %v219
  %v3187 = vunpack.c.l.b16 %v220
  %v3188 = vunpack.c.l.b16 %v221
  %v3189 = vunpack.c.l.b16 %v222
  %v3190 = vunpack.c.l.b16 %v223
  %v3191 = vunpack.c.l.b16 %v224
  %v3192 = vunpack.c.l.b16 %v225
  %v3193 = vunpack.c.l.b16 %v226
  %v3194 = vunpack.c.l.b16 %v227
  %v3195 = vunpack.c.l.b16 %v228
  %v3196 = vunpack.c.l.b16 %v229
  %v3197 = vunpack.c.l.b16 %v230
  %v3198 = vunpack.c.l.b16 %v231
  %v3199 = vunpack.c.l.b16 %v232
  %v3200 = vunpack.c.l.b16 %v233
  %v3201 = vunpack.c.l.b16 %v234
  %v3202 = vunpack.c.l.b16 %v235
  %v3203 = vunpack.c.l.b16 %v236
  %v3204 = vunpack.c.l.b16 %v237
  %v3205 = vunpack.c.l.b16 %v238
  %v3206 = vunpack.c.l.b16 %v239
  %v3207 = vunpack.c.l.b16 %v240
  %v3208 = vunpack.c.l.b16 %v241
  %v3209 = vunpack.c.l.b16 %v242
  %v3210 = vunpack.c.l.b16 %v243
  %v3211 = vunpack.c.l.b16 %v244
  %v3212 = vunpack.c.l.b16 %v245
  %v3213 = vunpack.c.l.b16 %v246
  %v3214 = vunpack.c.l.b16 %v247
  %v3215 = vunpack.c.l.b16 %v248
  %v3216 = vunpack.c.l.b16 %v249
  %v3217 = vunpack.c.l.b16 %v250
  %v3218 = vunpack.c.l.b16 %v251
  %v3219 = vunpack.c.l.b16 %v252
  %v3220 = vunpack.c.l.b16 %v253
  %v3221 = vunpack.c.l.b16 %v254
  %v3222 = vunpack.c.l.b16 %v255
  %v3223 = vunpack.c.l.b16 %v256
  %v3224 = vunpack.c.l.b16 %v257
  %v3225 = vunpack.c.l.b16 %v258
  %v3226 = vunpack.c.l.b16 %v259
  %v3227 = vunpack.c.l.b16 %v260
  %v3228 = vunpack.c.l.b16 %v261
  %v3229 = vunpack.c.l.b16 %v262
  %v3230 = vunpack.c.l.b16 %v263
  %v3231 = vunpack.c.l.b16 %v264
  %v3232 = vunpack.c.l.b16 %v265
  %v3233 = vunpack.c.l.b16 %v266
  %v3234 = vunpack.c.l.b16 %v267
  %v3235 = vunpack.c.l.b16 %v268
  %v3236 = vunpack.c.l.b16 %v269
  %v3237 = vunpack.c.l.b16 %v270
  %v3238 = vunpack.c.l.b16 %v271
  %v3239 = vunpack.c.l.b16 %v272
  %v3240 = vunpack.c.l.b16 %v273
  %v3241 = vunpack.c.l.b16 %v274
  %v3242 = vunpack.c.l.b16 %v275
  %v3243 = vunpack.c.l.b16 %v276
  %v3244 = vunpack.c.l.b16 %v277
  %v3245 = vunpack.c.l.b16 %v278
  %v3246 = vunpack.c.l.b16 %v279
  %v3247 = vunpack.c.l.b16 %v280
  %v3248 = vunpack.c.l.b16 %v281
  %v3249 = vunpack.c.l.b16 %v282
  %v3250 = vunpack.c.l.b16 %v283
  %v3251 = vunpack.c.l.b16 %v284
  %v3252 = vunpack.c.l.b16 %v285
  %v3253 = vunpack.c.l.b16 %v286
  %v3254 = vunpack.c.l.b16 %v287
  %v3255 = vunpack.c.l.b16 %v288
  %v3256 = vunpack.c.l.b16 %v289
  %v3257 = vunpack.c.l.b16 %v290
  %v3258 = vunpack.c.l.b16 %v291
  %v3259 = vunpack.c.l.b16 %v292
  %v3260 = vunpack.c.l.b16 %v293
  %v3261 = vunpack.c.l.b16 %v294
  %v3262 = vunpack.c.l.b16 %v295
  %v3263 = vunpack.c.l.b16 %v296
  %v3264 = vunpack.c.l.b16 %v297
  %v3265 = vunpack.c.l.b16 %v298
  %v3266 = vunpack.c.l.b16 %v299
  %v3267 = vunpack.c.l.b16 %v300
  %v3268 = vunpack.c.l.b16 %v301
  %v3269 = vunpack.c.l.b16 %v302
  %v3270 = vunpack.c.l.b16 %v303
  %v3271 = vunpack.c.l.b16 %v304
  %v3272 = vunpack.c.l.b16 %v305
  %v3273 = vunpack.c.l.b16 %v306
  %v3274 = vunpack.c.l.b16 %v307
  %v3275 = vunpack.c.l.b16 %v308
  %v3276 = vunpack.c.l.b16 %v309
  %v3277 = vunpack.c.l.b16 %v310
  %v3278 = vunpack.c.l.b16 %v311
  %v3279 = vunpack.c.l.b16 %v312
  %v3280 = vunpack.c.l.b16 %v313
  %v3281 = vunpack.c.l.b16 %v314
  %v3282 = vunpack.c.l.b16 %v315
  %v3283 = vunpack.c.l.b16 %v316
  %v3284 = vunpack.c.l.b16 %v317
  %v3285 = vunpack.c.l.b16 %v318
  %v3286 = vunpack.c.l.b16 %v319
  %v3287 = vunpack.c.l.b16 %v320
  %v3288 = vunpack.c.l.b16 %v321
  %v3289 = vunpack.c.l.b16 %v322
  %v3290 = vunpack.c.l.b16 %v323
  %v3291 = vunpack.c.l.b16 %v324
  %v3292 = vunpack.c.l.b16 %v325
  %v3293 = vunpack.c.l.b16 %v326
  %v3294 = vunpack.c.l.b16 %v327
  %v3295 = vunpack.c.l.b16 %v328
  %v3296 = vunpack.c.l.b16 %v329
  %v3297 = vunpack.c.l.b16 %v330
  %v3298 = vunpack.c.l.b16 %v331
  %v3299 = vunpack.c.l.b16 %v332
  %v3300 = vunpack.c.l.b16 %v333
  %v3301 = vunpack.c.l.b16 %v334
  %v3302 = vunpack.c.l.b16 %v335
  %v3303 = vunpack.c.l.b16 %v336
  %v3304 = vunpack.c.l.b16 %v337
  %v3305 = vunpack.c.l.b16 %v338
  %v3306 = vunpack.c.l.b16 %v339
  %v3307 = vunpack.c.l.b16 %v340
  %v3308 = vunpack.c.l.b16 %v341
  %v3309 = vunpack.c.l.b16 %v342
  %v3310 = vunpack.c.l.b16 %v343
  %v3311 = vunpack.c.l.b16 %v344
  %v3312 = vunpack.c.l.b16 %v345
  %v3313 = vunpack.c.l.b16 %v346
  %v3314 = vunpack.c.l.b16 %v347
  %v3315 = vunpack.c.l.b16 %v348
  %v3316 = vunpack.c.l.b16 %v349
  %v3317 = vunpack.c.l.b16 %v350
  %v3318 = vunpack.c.l.b16 %v351
  %v3319 = vunpack.c.l.b16 %v352
  %v3320 = vunpack.c.l.b16 %v353
  %v3321 = vunpack.c.l.b16 %v354
  %v3322 = vunpack.c.l.b16 %v355
  %v3323 = vunpack.c.l.b16 %v356
  %v3324 = vunpack.c.l.b16 %v357
  %v3325 = vunpack.c.l.b16 %v358
  %v3326 = vunpack.c.l.b16 %v359
  %v3327 = vunpack.c.l.b16 %v360
  %v3328 = vunpack.c.l.b16 %v361
  %v3329 = vunpack.c.l.b16 %v362
  %v3330 = vunpack.c.l.b16 %v363
  %v3331 = vunpack.c.l.b16 %v364
  %v3332 = vunpack.c.l.b16 %v365
  %v3333 = vunpack.c.l.b16 %v366
  %v3334 = vunpack.c.l.b16 %v367
  %v3335 = vunpack.c.l.b16 %v368
  %v3336 = vunpack.c.l.b16 %v369
  %v3337 = vunpack.c.l.b16 %v370
  %v3338 = vunpack.c.l.b16 %v371
  %v3339 = vunpack.c.l.b16 %v372
  %v3340 = vunpack.c.l.b16 %v373
  %v3341 = vunpack.c.l.b16 %v374
  %v3342 = vunpack.c.l.b16 %v375
  %v3343 = vunpack.c.l.b16 %v376
  %v3344 = vunpack.c.l.b16 %v377
  %v3345 = vunpack.c.l.b16 %v378
  %v3346 = vunpack.c.l.b16 %v379
  %v3347 = vunpack.c.l.b16 %v380
  %v3348 = vunpack.c.l.b16 %v381
  %v3349 = vunpack.c.l.b16 %v382
  %v3350 = vunpack.c.l.b16 %v383
  %v3351 = vunpack.c.l.b16 %v384
  %v3352 = vunpack.c.l.b16 %v385
  %v3353 = vunpack.c.l.b16 %v386
  %v3354 = vunpack.c.l.b16 %v387
  %v3355 = vunpack.c.l.b16 %v388
  %v3356 = vunpack.c.l.b16 %v389
  %v3357 = vunpack.c.l.b16 %v390
  %v3358 = vunpack.c.l.b16 %v391
  %v3359 = vunpack.c.l.b16 %v392
  %v3360 = vunpack.c.l.b16 %v393
  %v3361 = vunpack.c.l.b16 %v394
  %v3362 = vunpack.c.l.b16 %v395
  %v3363 = vunpack.c.l.b16 %v396
  %v3364 = vunpack.c.l.b16 %v397
  %v3365 = vunpack.c.l.b16 %v398
  %v3366 = vunpack.c.l.b16 %v399
  %v3367 = vunpack.c.l.b16 %v400
  %v3368 = vunpack.c.l.b16 %v401
  %v3369 = vunpack.c.l.b16 %v402
  %v3370 = vunpack.c.l.b16 %v403
  %v3371 = vunpack.c.l.b16 %v404
  %v3372 = vunpack.c.l.b16 %v405
  %v3373 = vunpack.c.l.b16 %v406
  %v3374 = vunpack.c.l.b16 %v407
  %v3375 = vunpack.c.l.b16 %v408
  %v3376 = vunpack.c.l.b16 %v409
  %v3377 = vunpack.c.l.b16 %v410
  %v3378 = vunpack.c.l.b16 %v411
  %v3379 = vunpack.c.l.b16 %v412
  %v3380 = vunpack.c.l.b16 %v413
  %v3381 = vunpack.c.l.b16 %v414
  %v3382 = vunpack.c.l.b16 %v415
  %v3383 = vunpack.c.l.b16 %v416
  %v3384 = vunpack.c.l.b16 %v417
  %v3385 = vunpack.c.l.b16 %v418
  %v3386 = vunpack.c.l.b16 %v419
  %v3387 = vunpack.c.l.b16 %v420
  %v3388 = vunpack.c.l.b16 %v421
  %v3389 = vunpack.c.l.b16 %v422
  %v3390 = vunpack.c.l.b16 %v423
  %v3391 = vunpack.c.l.b16 %v424
  %v3392 = vunpack.c.l.b16 %v425
  %v3393 = vunpack.c.l.b16 %v426
  %v3394 = vunpack.c.l.b16 %v427
  %v3395 = vunpack.c.l.b16 %v428
  %v3396 = vunpack.c.l.b16 %v429
  %v3397 = vunpack.c.l.b16 %v430
  %v3398 = vunpack.c.l.b16 %v431
  %v3399 = vunpack.c.l.b16 %v432
  %v3400 = vunpack.c.l.b16 %v433
  %v3401 = vunpack.c.l.b16 %v434
  %v3402 = vunpack.c.l.b16 %v435
  %v3403 = vunpack.c.l.b16 %v436
  %v3404 = vunpack.c.l.b16 %v437
  %v3405 = vunpack.c.l.b16 %v438
  %v3406 = vunpack.c.l.b16 %v439
  %v3407 = vunpack.c.l.b16 %v440
  %v3408 = vunpack.c.l.b16 %v441
  %v3409 = vunpack.c.l.b16 %v442
  %v3410 = vunpack.c.l.b16 %v443
  %v3411 = vunpack.c.l.b16 %v444
  %v3412 = vunpack.c.l.b16 %v445
  %v3413 = vunpack.c.l.b16 %v446
  %v3414 = vunpack.c.l.b16 %v447
  %v3415 = vunpack.c.l.b16 %v448
  %v3416 = vunpack.c.l.b16 %v449
  %v3417 = vunpack.c.l.b16 %v450
  %v3418 = vunpack.c.l.b16 %v451
  %v3419 = vunpack.c.l.b16 %v452
  %v3420 = vunpack.c.l.b16 %v453
  %v3421 = vunpack.c.l.b16 %v454
  %v3422 = vunpack.c.l.b16 %v455
  %v3423 = vunpack.c.l.b16 %v456
  %v3424 = vunpack.c.l.b16 %v457
  %v3425 = vunpack.c.l.b16 %v458
  %v3426 = vunpack.c.l.b16 %v459
  %v3427 = vunpack.c.l.b16 %v460
  %v3428 = vunpack.c.l.b16 %v461
  %v3429 = vunpack.c.l.b16 %v462
  %v3430 = vunpack.c.l.b16 %v463
  %v3431 = vunpack.c.l.b16 %v464
  %v3432 = vunpack.c.l.b16 %v465
  %v3433 = vunpack.c.l.b16 %v466
  %v3434 = vunpack.c.l.b16 %v467
  %v3435 = vunpack.c.l.b16 %v468
  %v3436 = vunpack.c.l.b16 %v469
  %v3437 = vunpack.c.l.b16 %v470
  %v3438 = vunpack.c.l.b16 %v471
  %v3439 = vunpack.c.l.b16 %v472
  %v3440 = vunpack.c.l.b16 %v473
  %v3441 = vunpack.c.l.b16 %v474
  %v3442 = vunpack.c.l.b16 %v475
  %v3443 = vunpack.c.l.b16 %v476
  %v3444 = vunpack.c.l.b16 %v477
  %v3445 = vunpack.c.l.b16 %v478
  %v3446 = vunpack.c.l.b16 %v479
  %v3447 = vunpack.c.l.b16 %v480
  %v3448 = vunpack.c.l.b16 %v481
  %v3449 = vunpack.c.l.b16 %v482
  %v3450 = vunpack.c.l.b16 %v483
  %v3451 = vunpack.c.l.b16 %v484
  %v3452 = vunpack.c.l.b16 %v485
  %v3453 = vunpack.c.l.b16 %v486
  %v3454 = vunpack.c.l.b16 %v487
  %v3455 = vunpack.c.l.b16 %v488
  %v3456 = vunpack.c.l.b16 %v489
  %v3457 = vunpack.c.l.b16 %v490
  %v3458 = vunpack.c.l.b16 %v491
  %v3459 = vunpack.c.l.b16 %v492
  %v3460 = vunpack.c.l.b16 %v493
  %v3461 = vunpack.c.l.b16 %v494
  %v3462 = vunpack.c.l.b16 %v495
  %v3463 = vunpack.c.l.b16 %v496
  %v3464 = vunpack.c.l.b16 %v497
  %v3465 = vunpack.c.l.b16 %v498
  %v3466 = vunpack.c.l.b16 %v499
  %v3467 = vunpack.c.l.b16 %v500
  %v3468 = vunpack.c.l.b16 %v501
  %v3469 = vunpack.c.l.b16 %v502
  %v3470 = vunpack.c.l.b16 %v503
  %v3471 = vunpack.c.l.b16 %v504
  %v3472 = vunpack.c.l.b16 %v505
  %v3473 = vunpack.c.l.b16 %v506
  %v3474 = vunpack.c.l.b16 %v507
  %v3475 = vunpack.c.l.b16 %v508
  %v3476 = vunpack.c.l.b16 %v509
  %v3477 = vunpack.c.l.b16 %v510
  %v3478 = vunpack.c.l.b16 %v511
  %v3479 = vunpack.c.l.b16 %v512
  %v3480 = vunpack.c.l.b16 %v513
  %v3481 = vunpack.c.l.b16 %v514
  %v3482 = vunpack.c.l.b16 %v515
  %v3483 = vunpack.c.l.b16 %v516
  %v3484 = vunpack.c.l.b16 %v517
  %v3485 = vunpack.c.l.b16 %v518
  %v3486 = vunpack.c.l.b16 %v519
  %v3487 = vunpack.c.l.b16 %v520
  %v3488 = vunpack.c.l.b16 %v521
  %v3489 = vunpack.c.l.b16 %v522
  %v3490 = vunpack.c.l.b16 %v523
  %v3491 = vunpack.c.l.b16 %v524
  %v3492 = vunpack.c.l.b16 %v525
  %v3493 = vunpack.c.l.b16 %v526
  %v3494 = vunpack.c.l.b16 %v527
  %v3495 = vunpack.c.l.b16 %v528
  %v3496 = vunpack.c.l.b16 %v529
  %v3497 = vunpack.c.l.b16 %v530
  %v3498 = vunpack.c.l.b16 %v531
  %v3499 = vunpack.c.l.b16 %v532
  %v3500 = vunpack.c.l.b16 %v533
  %v3501 = vunpack.c.l.b16 %v534
  %v3502 = vunpack.c.l.b16 %v535
  %v3503 = vunpack.c.l.b16 %v536
  %v3504 = vunpack.c.l.b16 %v537
  %v3505 = vunpack.c.l.b16 %v538
  %v3506 = vunpack.c.l.b16 %v539
  %v3507 = vunpack.c.l.b16 %v540
  %v3508 = vunpack.c.l.b16 %v541
  %v3509 = vunpack.c.l.b16 %v542
  %v3510 = vunpack.c.l.b16 %v543
  %v3511 = vunpack.c.l.b16 %v544
  %v3512 = vunpack.c.l.b16 %v545
  %v3513 = vunpack.c.l.b16 %v546
  %v3514 = vunpack.c.l.b16 %v547
  %v3515 = vunpack.c.l.b16 %v548
  %v3516 = vunpack.c.l.b16 %v549
  %v3517 = vunpack.c.l.b16 %v550
  %v3518 = vunpack.c.l.b16 %v551
  %v3519 = vunpack.c.l.b16 %v552
  %v3520 = vunpack.c.l.b16 %v553
  %v3521 = vunpack.c.l.b16 %v554
  %v3522 = vunpack.c.l.b16 %v555
  %v3523 = vunpack.c.l.b16 %v556
  %v3524 = vunpack.c.l.b16 %v557
  %v3525 = vunpack.c.l.b16 %v558
  %v3526 = vunpack.c.l.b16 %v559
  %v3527 = vunpack.c.l.b16 %v560
  %v3528 = vunpack.c.l.b16 %v561
  %v3529 = vunpack.c.l.b16 %v562
  %v3530 = vunpack.c.l.b16 %v563
  %v3531 = vunpack.c.l.b16 %v564
  %v3532 = vunpack.c.l.b16 %v565
  %v3533 = vunpack.c.l.b16 %v566
  %v3534 = vunpack.c.l.b16 %v567
  %v3535 = vunpack.c.l.b16 %v568
  %v3536 = vunpack.c.l.b16 %v569
  %v3537 = vunpack.c.l.b16 %v570
  %v3538 = vunpack.c.l.b16 %v571
  %v3539 = vunpack.c.l.b16 %v572
  %v3540 = vunpack.c.l.b16 %v573
  %v3541 = vunpack.c.l.b16 %v574
  %v3542 = vunpack.c.l.b16 %v575
  %v3543 = vunpack.c.l.b16 %v576
  %v3544 = vunpack.c.l.b16 %v577
  %v3545 = vunpack.c.l.b16 %v578
  %v3546 = vunpack.c.l.b16 %v579
  %v3547 = vunpack.c.l.b16 %v580
  %v3548 = vunpack.c.l.b16 %v581
  %v3549 = vunpack.c.l.b16 %v582
  %v3550 = vunpack.c.l.b16 %v583
  %v3551 = vunpack.c.l.b16 %v584
  %v3552 = vunpack.c.l.b16 %v585
  %v3553 = vunpack.c.l.b16 %v586
  %v3554 = vunpack.c.l.b16 %v587
  %v3555 = vunpack.c.l.b16 %v588
  %v3556 = vunpack.c.l.b16 %v589
  %v3557 = vunpack.c.l.b16 %v590
  %v3558 = vunpack.c.l.b16 %v591
  %v3559 = vunpack.c.l.b16 %v592
  %v3560 = vunpack.c.l.b16 %v593
  %v3561 = vunpack.c.l.b16 %v594
  %v3562 = vunpack.c.l.b16 %v595
  %v3563 = vunpack.c.l.b16 %v596
  %v3564 = vunpack.c.l.b16 %v597
  %v3565 = vunpack.c.l.b16 %v598
  %v3566 = vunpack.c.l.b16 %v599
  %v3567 = vunpack.c.l.b16 %v600
  %v3568 = vunpack.c.l.b16 %v601
  %v3569 = vunpack.c.l.b16 %v602
  %v3570 = vunpack.c.l.b16 %v603
  %v3571 = vunpack.c.l.b16 %v604
  %v3572 = vunpack.c.l.b16 %v605
  %v3573 = vunpack.c.l.b16 %v606
  %v3574 = vunpack.c.l.b16 %v607
  %v3575 = vunpack.c.l.b16 %v608
  %v3576 = vunpack.c.l.b16 %v609
  %v3577 = vunpack.c.l.b16 %v610
  %v3578 = vunpack.c.l.b16 %v611
  %v3579 = vunpack.c.l.b16 %v612
  %v3580 = vunpack.c.l.b16 %v613
  %v3581 = vunpack.c.l.b16 %v614
  %v3582 = vunpack.c.l.b16 %v615
  %v3583 = vunpack.c.l.b16 %v616
  %v3584 = vunpack.c.l.b16 %v617
  %v3585 = vunpack.c.l.b16 %v618
  %v3586 = vunpack.c.l.b16 %v619
  %v3587 = vunpack.c.l.b16 %v620
  %v3588 = vunpack.c.l.b16 %v621
  %v3589 = vunpack.c.l.b16 %v622
  %v3590 = vunpack.c.l.b16 %v623
  %v3591 = vunpack.c.l.b16 %v624
  %v3592 = vunpack.c.l.b16 %v625
  %v3593 = vunpack.c.l.b16 %v626
  %v3594 = vunpack.c.l.b16 %v627
  %v3595 = vunpack.c.l.b16 %v628
  %v3596 = vunpack.c.l.b16 %v629
  %v3597 = vunpack.c.l.b16 %v630
  %v3598 = vunpack.c.l.b16 %v631
  %v3599 = vunpack.c.l.b16 %v632
  %v3600 = vunpack.c.l.b16 %v633
  %v3601 = vunpack.c.l.b16 %v634
  %v3602 = vunpack.c.l.b16 %v635
  %v3603 = vunpack.c.l.b16 %v636
  %v3604 = vunpack.c.l.b16 %v637
  %v3605 = vunpack.c.l.b16 %v638
  %v3606 = vunpack.c.l.b16 %v639
  %v3607 = vunpack.c.l.b16 %v640
  %v3608 = vunpack.c.l.b16 %v641
  %v3609 = vunpack.c.l.b16 %v642
  %v3610 = vunpack.c.l.b16 %v643
  %v3611 = vunpack.c.l.b16 %v644
  %v3612 = vunpack.c.l.b16 %v645
  %v3613 = vunpack.c.l.b16 %v646
  %v3614 = vunpack.c.l.b16 %v647
  %v3615 = vunpack.c.l.b16 %v648
  %v3616 = vunpack.c.l.b16 %v649
  %v3617 = vunpack.c.l.b16 %v650
  %v3618 = vunpack.c.l.b16 %v651
  %v3619 = vunpack.c.l.b16 %v652
  %v3620 = vunpack.c.l.b16 %v653
  %v3621 = vunpack.c.l.b16 %v654
  %v3622 = vunpack.c.l.b16 %v655
  %v3623 = vunpack.c.l.b16 %v656
  %v3624 = vunpack.c.l.b16 %v657
  %v3625 = vunpack.c.l.b16 %v658
  %v3626 = vunpack.c.l.b16 %v659
  %v3627 = vunpack.c.l.b16 %v660
  %v3628 = vunpack.c.l.b16 %v661
  %v3629 = vunpack.c.l.b16 %v662
  %v3630 = vunpack.c.l.b16 %v663
  %v3631 = vunpack.c.l.b16 %v664
  %v3632 = vunpack.c.l.b16 %v665
  %v3633 = vunpack.c.l.b16 %v666
  %v3634 = vunpack.c.l.b16 %v667
  %v3635 = vunpack.c.l.b16 %v668
  %v3636 = vunpack.c.l.b16 %v669
  %v3637 = vunpack.c.l.b16 %v670
  %v3638 = vunpack.c.l.b16 %v671
  %v3639 = vunpack.c.l.b16 %v672
  %v3640 = vunpack.c.l.b16 %v673
  %v3641 = vunpack.c.l.b16 %v674
  %v3642 = vunpack.c.l.b16 %v675
  %v3643 = vunpack.c.l.b16 %v676
  %v3644 = vunpack.c.l.b16 %v677
  %v3645 = vunpack.c.l.b16 %v678
  %v3646 = vunpack.c.l.b16 %v679
  %v3647 = vunpack.c.l.b16 %v680
  %v3648 = vunpack.c.l.b16 %v681
  %v3649 = vunpack.c.l.b16 %v682
  %v3650 = vunpack.c.l.b16 %v683
  %v3651 = vunpack.c.l.b16 %v684
  %v3652 = vunpack.c.l.b16 %v685
  %v3653 = vunpack.c.l.b16 %v686
  %v3654 = vunpack.c.l.b16 %v687
  %v3655 = vunpack.c.l.b16 %v688
  %v3656 = vunpack.c.l.b16 %v689
  %v3657 = vunpack.c.l.b16 %v690
  %v3658 = vunpack.c.l.b16 %v691
  %v3659 = vunpack.c.l.b16 %v692
  %v3660 = vunpack.c.l.b16 %v693
  %v3661 = vunpack.c.l.b16 %v694
  %v3662 = vunpack.c.l.b16 %v695
  %v3663 = vunpack.c.l.b16 %v696
  %v3664 = vunpack.c.l.b16 %v697
  %v3665 = vunpack.c.l.b16 %v698
  %v3666 = vunpack.c.l.b16 %v699
  %v3667 = vunpack.c.l.b16 %v700
  %v3668 = vunpack.c.l.b16 %v701
  %v3669 = vunpack.c.l.b16 %v702
  %v3670 = vunpack.c.l.b16 %v703
  %v3671 = vunpack.c.l.b16 %v704
  %v3672 = vunpack.c.l.b16 %v705
  %v3673 = vunpack.c.l.b16 %v706
  %v3674 = vunpack.c.l.b16 %v707
  %v3675 = vunpack.c.l.b16 %v708
  %v3676 = vunpack.c.l.b16 %v709
  %v3677 = vunpack.c.l.b16 %v710
  %v3678 = vunpack.c.l.b16 %v711
  %v3679 = vunpack.c.l.b16 %v712
  %v3680 = vunpack.c.l.b16 %v713
  %v3681 = vunpack.c.l.b16 %v714
  %v3682 = vunpack.c.l.b16 %v715
  %v3683 = vunpack.c.l.b16 %v716
  %v3684 = vunpack.c.l.b16 %v717
  %v3685 = vunpack.c.l.b16 %v718
  %v3686 = vunpack.c.l.b16 %v719
  %v3687 = vunpack.c.l.b16 %v720
  %v3688 = vunpack.c.l.b16 %v721
  %v3689 = vunpack.c.l.b16 %v722
  %v3690 = vunpack.c.l.b16 %v723
  %v3691 = vunpack.c.l.b16 %v724
  %v3692 = vunpack.c.l.b16 %v725
  %v3693 = vunpack.c.l.b16 %v726
  %v3694 = vunpack.c.l.b16 %v727
  %v3695 = vunpack.c.l.b16 %v728
  %v3696 = vunpack.c.l.b16 %v729
  %v3697 = vunpack.c.l.b16 %v730
  %v3698 = vunpack.c.l.b16 %v731
  %v3699 = vunpack.c.l.b16 %v732
  %v3700 = vunpack.c.l.b16 %v733
  %v3701 = vunpack.c.l.b16 %v734
  %v3702 = vunpack.c.l.b16 %v735
  %v3703 = vunpack.c.l.b16 %v736
  %v3704 = vunpack.c.l.b16 %v737
  %v3705 = vunpack.c.l.b16 %v738
  %v3706 = vunpack.c.l.b16 %v739
  %v3707 = vunpack.c.l.b16 %v740
  %v3708 = vunpack.c.l.b16 %v741
  %v3709 = vunpack.c.l.b16 %v742
  %v3710 = vunpack.c.l.b16 %v743
  %v3711 = vunpack.c.l.b16 %v744
  %v3712 = vunpack.c.l.b16 %v745
  %v3713 = vunpack.c.l.b16 %v746
  %v3714 = vunpack.c.l.b16 %v747
  %v3715 = vunpack.c.l.b16 %v748
  %v3716 = vunpack.c.l.b16 %v749
  %v3717 = vunpack.c.l.b16 %v750
  %v3718 = vunpack.c.l.b16 %v751
  %v3719 = vunpack.c.l.b16 %v752
  %v3720 = vunpack.c.l.b16 %v753
  %v3721 = vunpack.c.l.b16 %v754
  %v3722 = vunpack.c.l.b16 %v755
  %v3723 = vunpack.c.l.b16 %v756
  %v3724 = vunpack.c.l.b16 %v757
  %v3725 = vunpack.c.l.b16 %v758
  %v3726 = vunpack.c.l.b16 %v759
  %v3727 = vunpack.c.l.b16 %v760
  %v3728 = vunpack.c.l.b16 %v761
  %v3729 = vunpack.c.l.b16 %v762
  %v3730 = vunpack.c.l.b16 %v763
  %v3731 = vunpack.c.l.b16 %v764
  %v3732 = vunpack.c.l.b16 %v765
  %v3733 = vunpack.c.l.b16 %v766
  %v3734 = vunpack.c.l.b16 %v767
  %v3735 = vunpack.c.l.b16 %v768
  %v3736 = vunpack.c.l.b16 %v769
  %v3737 = vunpack.c.l.b16 %v770
  %v3738 = vunpack.c.l.b16 %v771
  %v3739 = vunpack.c.l.b16 %v772
  %v3740 = vunpack.c.l.b16 %v773
  %v3741 = vunpack.c.l.b16 %v774
  %v3742 = vunpack.c.l.b16 %v775
  %v3743 = vunpack.c.l.b16 %v776
  %v3744 = vunpack.c.l.b16 %v777
  %v3745 = vunpack.c.l.b16 %v778
  %v3746 = vunpack.c.l.b16 %v779
  %v3747 = vunpack.c.l.b16 %v780
  %v3748 = vunpack.c.l.b16 %v781
  %v3749 = vunpack.c.l.b16 %v782
  %v3750 = vunpack.c.l.b16 %v783
  %v3751 = vunpack.c.l.b16 %v784
  %v3752 = vunpack.c.l.b16 %v785
  %v3753 = vunpack.c.l.b16 %v786
  %v3754 = vunpack.c.l.b16 %v787
  %v3755 = vunpack.c.l.b16 %v788
  %v3756 = vunpack.c.l.b16 %v789
  %v3757 = vunpack.c.l.b16 %v790
  %v3758 = vunpack.c.l.b16 %v791
  %v3759 = vunpack.c.l.b16 %v792
  %v3760 = vunpack.c.l.b16 %v793
  %v3761 = vunpack.c.l.b16 %v794
  %v3762 = vunpack.c.l.b16 %v795
  %v3763 = vunpack.c.l.b16 %v796
  %v3764 = vunpack.c.l.b16 %v797
  %v3765 = vunpack.c.l.b16 %v798
  %v3766 = vunpack.c.l.b16 %v799
  %v3767 = vunpack.c.l.b16 %v800
  %v3768 = vunpack.c.l.b16 %v801
  %v3769 = vunpack.c.l.b16 %v802
  %v3770 = vunpack.c.l.b16 %v803
  %v3771 = vunpack.c.l.b16 %v804
  %v3772 = vunpack.c.l.b16 %v805
  %v3773 = vunpack.c.l.b16 %v806
  %v3774 = vunpack.c.l.b16 %v807
  %v3775 = vunpack.c.l.b16 %v808
  %v3776 = vunpack.c.l.b16 %v809
  %v3777 = vunpack.c.l.b16 %v810
  %v3778 = vunpack.c.l.b16 %v811
  %v3779 = vunpack.c.l.b16 %v812
  %v3780 = vunpack.c.l.b16 %v813
  %v3781 = vunpack.c.l.b16 %v814
  %v3782 = vunpack.c.l.b16 %v815
  %v3783 = vunpack.c.l.b16 %v816
  %v3784 = vunpack.c.l.b16 %v817
  %v3785 = vunpack.c.l.b16 %v818
  %v3786 = vunpack.c.l.b16 %v819
  %v3787 = vunpack.c.l.b16 %v820
  %v3788 = vunpack.c.l.b16 %v821
  %v3789 = vunpack.c.l.b16 %v822
  %v3790 = vunpack.c.l.b16 %v823
  %v3791 = vunpack.c.l.b16 %v824
  %v3792 = vunpack.c.l.b16 %v825
  %v3793 = vunpack.c.l.b16 %v826
  %v3794 = vunpack.c.l.b16 %v827
  %v3795 = vunpack.c.l.b16 %v828
  %v3796 = vunpack.c.l.b16 %v829
  %v3797 = vunpack.c.l.b16 %v830
  %v3798 = vunpack.c.l.b16 %v831
  %v3799 = vunpack.c.l.b16 %v832
  %v3800 = vunpack.c.l.b16 %v833
  %v3801 = vunpack.c.l.b16 %v834
  %v3802 = vunpack.c.l.b16 %v835
  %v3803 = vunpack.c.l.b16 %v836
  %v3804 = vunpack.c.l.b16 %v837
  %v3805 = vunpack.c.l.b16 %v838
  %v3806 = vunpack.c.l.b16 %v839
  %v3807 = vunpack.c.l.b16 %v840
  %v3808 = vunpack.c.l.b16 %v841
  %v3809 = vunpack.c.l.b16 %v842
  %v3810 = vunpack.c.l.b16 %v843
  %v3811 = vunpack.c.l.b16 %v844
  %v3812 = vunpack.c.l.b16 %v845
  %v3813 = vunpack.c.l.b16 %v846
  %v3814 = vunpack.c.l.b16 %v847
  %v3815 = vunpack.c.l.b16 %v848
  %v3816 = vunpack.c.l.b16 %v849
  %v3817 = vunpack.c.l.b16 %v850
  %v3818 = vunpack.c.l.b16 %v851
  %v3819 = vunpack.c.l.b16 %v852
  %v3820 = vunpack.c.l.b16 %v853
  %v3821 = vunpack.c.l.b16 %v854
  %v3822 = vunpack.c.l.b16 %v855
  %v3823 = vunpack.c.l.b16 %v856
  %v3824 = vunpack.c.l.b16 %v857
  %v3825 = vunpack.c.l.b16 %v858
  %v3826 = vunpack.c.l.b16 %v859
  %v3827 = vunpack.c.l.b16 %v860
  %v3828 = vunpack.c.l.b16 %v861
  %v3829 = vunpack.c.l.b16 %v862
  %v3830 = vunpack.c.l.b16 %v863
  %v3831 = vunpack.c.l.b16 %v864
  %v3832 = vunpack.c.l.b16 %v865
  %v3833 = vunpack.c.l.b16 %v866
  %v3834 = vunpack.c.l.b16 %v867
  %v3835 = vunpack.c.l.b16 %v868
  %v3836 = vunpack.c.l.b16 %v869
  %v3837 = vunpack.c.l.b16 %v870
  %v3838 = vunpack.c.l.b16 %v871
  %v3839 = vunpack.c.l.b16 %v872
  %v3840 = vunpack.c.l.b16 %v873
  %v3841 = vunpack.c.l.b16 %v874
  %v3842 = vunpack.c.l.b16 %v875
  %v3843 = vunpack.c.l.b16 %v876
  %v3844 = vunpack.c.l.b16 %v877
  %v3845 = vunpack.c.l.b16 %v878
  %v3846 = vunpack.c.l.b16 %v879
  %v3847 = vunpack.c.l.b16 %v880
  %v3848 = vunpack.c.l.b16 %v881
  %v3849 = vunpack.c.l.b16 %v882
  %v3850 = vunpack.c.l.b16 %v883
  %v3851 = vunpack.c.l.b16 %v884
  %v3852 = vunpack.c.l.b16 %v885
  %v3853 = vunpack.c.l.b16 %v886
  %v3854 = vunpack.c.l.b16 %v887
  %v3855 = vunpack.c.l.b16 %v888
  %v3856 = vunpack.c.l.b16 %v889
  %v3857 = vunpack.c.l.b16 %v890
  %v3858 = vunpack.c.l.b16 %v891
  %v3859 = vunpack.c.l.b16 %v892
  %v3860 = vunpack.c.l.b16 %v893
  %v3861 = vunpack.c.l.b16 %v894
  %v3862 = vunpack.c.l.b16 %v895
  %v3863 = vunpack.c.l.b16 %v896
  %v3864 = vunpack.c.l.b16 %v897
  %v3865 = vunpack.c.l.b16 %v898
  %v3866 = vunpack.c.l.b16 %v899
  %v3867 = vunpack.c.l.b16 %v900
  %v3868 = vunpack.c.l.b16 %v901
  %v3869 = vunpack.c.l.b16 %v902
  %v3870 = vunpack.c.l.b16 %v903
  %v3871 = vunpack.c.l.b16 %v904
  %v3872 = vunpack.c.l.b16 %v905
  %v3873 = vunpack.c.l.b16 %v906
  %v3874 = vunpack.c.l.b16 %v907
  %v3875 = vunpack.c.l.b16 %v908
  %v3876 = vunpack.c.l.b16 %v909
  %v3877 = vunpack.c.l.b16 %v910
  %v3878 = vunpack.c.l.b16 %v911
  %v3879 = vunpack.c.l.b16 %v912
  %v3880 = vunpack.c.l.b16 %v913
  %v3881 = vunpack.c.l.b16 %v914
  %v3882 = vunpack.c.l.b16 %v915
  %v3883 = vunpack.c.l.b16 %v916
  %v3884 = vunpack.c.l.b16 %v917
  %v3885 = vunpack.c.l.b16 %v918
  %v3886 = vunpack.c.l.b16 %v919
  %v3887 = vunpack.c.l.b16 %v920
  %v3888 = vunpack.c.l.b16 %v921
  %v3889 = vunpack.c.l.b16 %v922
  %v3890 = vunpack.c.l.b16 %v923
  %v3891 = vunpack.c.l.b16 %v924
  %v3892 = vunpack.c.l.b16 %v925
  %v3893 = vunpack.c.l.b16 %v926
  %v3894 = vunpack.c.l.b16 %v927
  %v3895 = vunpack.c.l.b16 %v928
  %v3896 = vunpack.c.l.b16 %v929
  %v3897 = vunpack.c.l.b16 %v930
  %v3898 = vunpack.c.l.b16 %v931
  %v3899 = vunpack.c.l.b16 %v932
  %v3900 = vunpack.c.l.b16 %v933
  %v3901 = vunpack.c.l.b16 %v934
  %v3902 = vunpack.c.l.b16 %v935
  %v3903 = vunpack.c.l.b16 %v936
  %v3904 = vunpack.c.l.b16 %v937
  %v3905 = vunpack.c.l.b16 %v938
  %v3906 = vunpack.c.l.b16 %v939
  %v3907 = vunpack.c.l.b16 %v940
  %v3908 = vunpack.c.l.b16 %v941
  %v3909 = vunpack.c.l.b16 %v942
  %v3910 = vunpack.c.l.b16 %v943
  %v3911 = vunpack.c.l.b16 %v944
  %v3912 = vunpack.c.l.b16 %v945
  %v3913 = vunpack.c.l.b16 %v946
  %v3914 = vunpack.c.l.b16 %v947
  %v3915 = vunpack.c.l.b16 %v948
  %v3916 = vunpack.c.l.b16 %v949
  %v3917 = vunpack.c.l.b16 %v950
  %v3918 = vunpack.c.l.b16 %v951
  %v3919 = vunpack.c.l.b16 %v952
  %v3920 = vunpack.c.l.b16 %v953
  %v3921 = vunpack.c.l.b16 %v954
  %v3922 = vunpack.c.l.b16 %v955
  %v3923 = vunpack.c.l.b16 %v956
  %v3924 = vunpack.c.l.b16 %v957
  %v3925 = vunpack.c.l.b16 %v958
  %v3926 = vunpack.c.l.b16 %v959
  %v3927 = vunpack.c.l.b16 %v960
  %v3928 = vunpack.c.l.b16 %v961
  %v3929 = vunpack.c.l.b16 %v962
  %v3930 = vunpack.c.l.b16 %v963
  %v3931 = vunpack.c.l.b16 %v964
  %v3932 = vunpack.c.l.b16 %v965
  %v3933 = vunpack.c.l.b16 %v966
  %v3934 = vunpack.c.l.b16 %v967
  %v3935 = vunpack.c.l.b16 %v968
  %v3936 = vunpack.c.l.b16 %v969
  %v3937 = vunpack.c.l.b16 %v970
  %v3938 = vunpack.c.l.b16 %v971
  %v3939 = vunpack.c.l.b16 %v972
  %v3940 = vunpack.c.l.b16 %v973
  %v3941 = vunpack.c.l.b16 %v974
  %v3942 = vunpack.c.l.b16 %v975
  %v3943 = vunpack.c.l.b16 %v976
  %v3944 = vunpack.c.l.b16 %v977
  %v3945 = vunpack.c.l.b16 %v978
  %v3946 = vunpack.c.l.b16 %v979
  %v3947 = vunpack.c.l.b16 %v980
  %v3948 = vunpack.c.l.b16 %v981
  %v3949 = vunpack.c.l.b16 %v982
  %v3950 = vunpack.c.l.b16 %v983
  %v3951 = vunpack.c.l.b16 %v984
  %v3952 = vunpack.c.l.b16 %v985
  %v3953 = vunpack.c.l.b16 %v986
  %v3954 = vunpack.c.l.b16 %v987
  %v3955 = vunpack.c.l.b16 %v988
  %v3956 = vunpack.c.l.b16 %v989
  %v3957 = vunpack.c.l.b16 %v990
  %v3958 = vunpack.c.l.b16 %v991
  %v3959 = vunpack.c.l.b16 %v992
  %v3960 = vunpack.c.l.b16 %v993
  %v3961 = vunpack.c.l.b16 %v994
  %v3962 = vunpack.c.l.b16 %v995
  %v3963 = vunpack.c.l.b16 %v996
  %v3964 = vunpack.c.l.b16 %v997
  %v3965 = vunpack.c.l.b16 %v998
  %v3966 = vunpack.c.l.b16 %v999
  %v3967 = vunpack.c.l.b16 %v1000
  %v3968 = vunpack.c.l.b16 %v1001
  %v3969 = vunpack.c.l.b16 %v1002
  %v3970 = vunpack.c.l.b16 %v1003
  %v3971 = vunpack.c.l.b16 %v1004
  %v3972 = vunpack.c.l.b16 %v1005
  %v3973 = vunpack.c.l.b16 %v1006
  %v3974 = vunpack.c.l.b16 %v1007
  %v3975 = vunpack.c.l.b16 %v1008
  %v3976 = vunpack.c.l.b16 %v1009
  %v3977 = vunpack.c.l.b16 %v1010
  %v3978 = vunpack.c.l.b16 %v1011
  %v3979 = vunpack.c.l.b16 %v1012
  %v3980 = vunpack.c.l.b16 %v1013
  %v3981 = vunpack.c.l.b16 %v1014
  %v3982 = vunpack.c.l.b16 %v1015
  %v3983 = vunpack.c.l.b16 %v1016
  %v3984 = vunpack.c.l.b16 %v1017
  %v3985 = vunpack.c.l.b16 %v1018
  %v3986 = vunpack.c.l.b16 %v1019
  %v3987 = vunpack.c.l.b16 %v1020
  %v3988 = vunpack.c.l.b16 %v1021
  %v3989 = vunpack.c.l.b16 %v1022
  %v3990 = vunpack.c.l.b16 %v1023
  %v3991 = vunpack.c.l.b16 %v1024
  %v3992 = vunpack.c.l.b16 %v1025
  %v3993 = vunpack.c.l.b16 %v1026
  %v3994 = vunpack.c.l.b16 %v1027
  %v3995 = vunpack.c.l.b16 %v1028
  %v3996 = vunpack.c.l.b16 %v1029
  %v3997 = vunpack.c.l.b16 %v1030
  %v3998 = vunpack.c.l.b16 %v1031
  %v3999 = vunpack.c.l.b16 %v1032
  %v4000 = vunpack.c.l.b16 %v1033
  %v4001 = vunpack.c.l.b16 %v1034
  %v4002 = vunpack.c.l.b16 %v1035
  %v4003 = vunpack.c.l.b16 %v1036
  %v4004 = vunpack.c.l.b16 %v1037
  %v4005 = vunpack.c.l.b16 %v1038
  %v4006 = vunpack.c.l.b16 %v1039
  %v4007 = vunpack.c.l.b16 %v1040
  %v4008 = vunpack.c.l.b16 %v1041
  %v4009 = vunpack.c.l.b16 %v1042
  %v4010 = vunpack.c.l.b16 %v1043
  %v4011 = vunpack.c.l.b16 %v1044
  %v4012 = vunpack.c.l.b16 %v1045
  %v4013 = vunpack.c.l.b16 %v1046
  %v4014 = vunpack.c.l.b16 %v1047
  %v4015 = vunpack.c.l.b16 %v1048
  %v4016 = vunpack.c.l.b16 %v1049
  %v4017 = vunpack.c.l.b16 %v1050
  %v4018 = vunpack.c.l.b16 %v1051
  %v4019 = vunpack.c.l.b16 %v1052
  %v4020 = vunpack.c.l.b16 %v1053
  %v4021 = vunpack.c.l.b16 %v1054
  %v4022 = vunpack.c.l.b16 %v1055
  %v4023 = vunpack.c.l.b16 %v1056
  %v4024 = vunpack.c.l.b16 %v1057
  %v4025 = vunpack.c.l.b16 %v1058
  %v4026 = vunpack.c.l.b16 %v1059
  %v4027 = vunpack.c.l.b16 %v1060
  %v4028 = vunpack.c.l.b16 %v1061
  %v4029 = vunpack.c.l.b16 %v1062
  %v4030 = vunpack.c.l.b16 %v1063
  %v4031 = vunpack.c.l.b16 %v1064
  %v4032 = vunpack.c.l.b16 %v1065
  %v4033 = vunpack.c.l.b16 %v1066
  %v4034 = vunpack.c.l.b16 %v1067
  %v4035 = vunpack.c.l.b16 %v1068
  %v4036 = vunpack.c.l.b16 %v1069
  %v4037 = vunpack.c.l.b16 %v1070
  %v4038 = vunpack.c.l.b16 %v1071
  %v4039 = vunpack.c.l.b16 %v1072
  %v4040 = vunpack.c.l.b16 %v1073
  %v4041 = vunpack.c.l.b16 %v1074
  %v4042 = vunpack.c.l.b16 %v1075
  %v4043 = vunpack.c.l.b16 %v1076
  %v4044 = vunpack.c.l.b16 %v1077
  %v4045 = vunpack.c.l.b16 %v1078
  %v4046 = vunpack.c.l.b16 %v1079
  %v4047 = vunpack.c.l.b16 %v1080
  %v4048 = vunpack.c.l.b16 %v1081
  %v4049 = vunpack.c.l.b16 %v1082
  %v4050 = vunpack.c.l.b16 %v1083
  %v4051 = vunpack.c.l.b16 %v1084
  %v4052 = vunpack.c.l.b16 %v1085
  %v4053 = vunpack.c.l.b16 %v1086
  %v4054 = vunpack.c.l.b16 %v1087
  %v4055 = vunpack.c.l.b16 %v1088
  %v4056 = vunpack.c.l.b16 %v1089
  %v4057 = vunpack.c.l.b16 %v1090
  %v4058 = vunpack.c.l.b16 %v1091
  %v4059 = vunpack.c.l.b16 %v1092
  %v4060 = vunpack.c.l.b16 %v1093
  %v4061 = vunpack.c.l.b16 %v1094
  %v4062 = vunpack.c.l.b16 %v1095
  %v4063 = vunpack.c.l.b16 %v1096
  %v4064 = vunpack.c.l.b16 %v1097
  %v4065 = vunpack.c.l.b16 %v1098
  %v4066 = vunpack.c.l.b16 %v1099
  %v4067 = vunpack.c.l.b16 %v1100
  %v4068 = vunpack.c.l.b16 %v1101
  %v4069 = vunpack.c.l.b16 %v1102
  %v4070 = vunpack.c.l.b16 %v1103
  %v4071 = vunpack.c.l.b16 %v1104
  %v4072 = vunpack.c.l.b16 %v1105
  %v4073 = vunpack.c.l.b16 %v1106
  %v4074 = vunpack.c.l.b16 %v1107
  %v4075 = vunpack.c.l.b16 %v1108
  %v4076 = vunpack.c.l.b16 %v1109
  %v4077 = vunpack.c.l.b16 %v1110
  %v4078 = vunpack.c.l.b16 %v1111
  %v4079 = vunpack.c.l.b16 %v1112
  %v4080 = vunpack.c.l.b16 %v1113
  %v4081 = vunpack.c.l.b16 %v1114
  %v4082 = vunpack.c.l.b16 %v1115
  %v4083 = vunpack.c.l.b16 %v1116
  %v4084 = vunpack.c.l.b16 %v1117
  %v4085 = vunpack.c.l.b16 %v1118
  %v4086 = vunpack.c.l.b16 %v1119
  %v4087 = vunpack.c.l.b16 %v1120
  %v4088 = vunpack.c.l.b16 %v1121
  %v4089 = vunpack.c.l.b16 %v1122
  %v4090 = vunpack.c.l.b16 %v1123
  %v4091 = vunpack.c.l.b16 %v1124
  %v4092 = vunpack.c.l.b16 %v1125
  %v4093 = vunpack.c.l.b16 %v1126
  %v4094 = vunpack.c.l.b16 %v1127
  %v4095 = vunpack.c.l.b16 %v1128
  %v4096 = vunpack.c.l.b16 %v1129
  %v4097 = vunpack.c.l.b16 %v1130
  %v4098 = vunpack.c.l.b16 %v1131
  %v4099 = vunpack.c.l.b16 %v1132
  %v4100 = vunpack.c.l.b16 %v1133
  %v4101 = vunpack.c.l.b16 %v1134
  %v4102 = vunpack.c.l.b16 %v1135
  %v4103 = vunpack.c.l.b16 %v1136
  %v4104 = vunpack.c.l.b16 %v1137
  %v4105 = vunpack.c.l.b16 %v1138
  %v4106 = vunpack.c.l.b16 %v1139
  %v4107 = vunpack.c.l.b16 %v1140
  %v4108 = vunpack.c.l.b16 %v1141
  %v4109 = vunpack.c.l.b16 %v1142
  %v4110 = vunpack.c.l.b16 %v1143
  %v4111 = vunpack.c.l.b16 %v1144
  %v4112 = vunpack.c.l.b16 %v1145
  %v4113 = vunpack.c.l.b16 %v1146
  %v4114 = vunpack.c.l.b16 %v1147
  %v4115 = vunpack.c.l.b16 %v1148
  %v4116 = vunpack.c.l.b16 %v1149
  %v4117 = vunpack.c.l.b16 %v1150
  %v4118 = vunpack.c.l.b16 %v1151
  %v4119 = vunpack.c.l.b16 %v1152
  %v4120 = vunpack.c.l.b16 %v1153
  %v4121 = vunpack.c.l.b16 %v1154
  %v4122 = vunpack.c.l.b16 %v1155
  %v4123 = vunpack.c.l.b16 %v1156
  %v4124 = vunpack.c.l.b16 %v1157
  %v4125 = vunpack.c.l.b16 %v1158
  %v4126 = vunpack.c.l.b16 %v1159
  %v4127 = vunpack.c.l.b16 %v1160
  %v4128 = vunpack.c.l.b16 %v1161
  %v4129 = vunpack.c.l.b16 %v1162
  %v4130 = vunpack.c.l.b16 %v1163
  %v4131 = vunpack.c.l.b16 %v1164
  %v4132 = vunpack.c.l.b16 %v1165
  %v4133 = vunpack.c.l.b16 %v1166
  %v4134 = vunpack.c.l.b16 %v1167
  %v4135 = vunpack.c.l.b16 %v1168
  %v4136 = vunpack.c.l.b16 %v1169
  %v4137 = vunpack.c.l.b16 %v1170
  %v4138 = vunpack.c.l.b16 %v1171
  %v4139 = vunpack.c.l.b16 %v1172
  %v4140 = vunpack.c.l.b16 %v1173
  %v4141 = vunpack.c.l.b16 %v1174
  %v4142 = vunpack.c.l.b16 %v1175
  %v4143 = vunpack.c.l.b16 %v1176
  %v4144 = vunpack.c.l.b16 %v1177
  %v4145 = vunpack.c.l.b16 %v1178
  %v4146 = vunpack.c.l.b16 %v1179
  %v4147 = vunpack.c.l.b16 %v1180
  %v4148 = vunpack.c.l.b16 %v1181
  %v4149 = vunpack.c.l.b16 %v1182
  %v4150 = vunpack.c.l.b16 %v1183
  %v4151 = vunpack.c.l.b16 %v1184
  %v4152 = vunpack.c.l.b16 %v1185
  %v4153 = vunpack.c.l.b16 %v1186
  %v4154 = vunpack.c.l.b16 %v1187
  %v4155 = vunpack.c.l.b16 %v1188
  %v4156 = vunpack.c.l.b16 %v1189
  %v4157 = vunpack.c.l.b16 %v1190
  %v4158 = vunpack.c.l.b16 %v1191
  %v4159 = vunpack.c.l.b16 %v1192
  %v4160 = vunpack.c.l.b16 %v1193
  %v4161 = vunpack.c.l.b16 %v1194
  %v4162 = vunpack.c.l.b16 %v1195
  %v4163 = vunpack.c.l.b16 %v1196
  %v4164 = vunpack.c.l.b16 %v1197
  %v4165 = vunpack.c.l.b16 %v1198
  %v4166 = vunpack.c.l.b16 %v1199
  %v4167 = vunpack.c.l.b16 %v1200
  %v4168 = vunpack.c.l.b16 %v1201
  %v4169 = vunpack.c.l.b16 %v1202
  %v4170 = vunpack.c.l.b16 %v1203
  %v4171 = vunpack.c.l.b16 %v1204
  %v4172 = vunpack.c.l.b16 %v1205
  %v4173 = vunpack.c.l.b16 %v1206
  %v4174 = vunpack.c.l.b16 %v1207
  %v4175 = vunpack.c.l.b16 %v1208
  %v4176 = vunpack.c.l.b16 %v1209
  %v4177 = vunpack.c.l.b16 %v1210
  %v4178 = vunpack.c.l.b16 %v1211
  %v4179 = vunpack.c.l.b16 %v1212
  %v4180 = vunpack.c.l.b16 %v1213
  %v4181 = vunpack.c.l.b16 %v1214
  %v4182 = vunpack.c.l.b16 %v1215
  %v4183 = vunpack.c.l.b16 %v1216
  %v4184 = vunpack.c.l.b16 %v1217
  %v4185 = vunpack.c.l.b16 %v1218
  %v4186 = vunpack.c.l.b16 %v1219
  %v4187 = vunpack.c.l.b16 %v1220
  %v4188 = vunpack.c.l.b16 %v1221
  %v4189 = vunpack.c.l.b16 %v1222
  %v4190 = vunpack.c.l.b16 %v1223
  %v4191 = vunpack.c.l.b16 %v1224
  %v4192 = vunpack.c.l.b16 %v1225
  %v4193 = vunpack.c.l.b16 %v1226
  %v4194 = vunpack.c.l.b16 %v1227
  %v4195 = vunpack.c.l.b16 %v1228
  %v4196 = vunpack.c.l.b16 %v1229
  %v4197 = vunpack.c.l.b16 %v1230
  %v4198 = vunpack.c.l.b16 %v1231
  %v4199 = vunpack.c.l.b16 %v1232
  %v4200 = vunpack.c.l.b16 %v1233
  %v4201 = vunpack.c.l.b16 %v1234
  %v4202 = vunpack.c.l.b16 %v1235
  %v4203 = vunpack.c.l.b16 %v1236
  %v4204 = vunpack.c.l.b16 %v1237
  %v4205 = vunpack.c.l.b16 %v1238
  %v4206 = vunpack.c.l.b16 %v1239
  %v4207 = vunpack.c.l.b16 %v1240
  %v4208 = vunpack.c.l.b16 %v1241
  %v4209 = vunpack.c.l.b16 %v1242
  %v4210 = vunpack.c.l.b16 %v1243
  %v4211 = vunpack.c.l.b16 %v1244
  %v4212 = vunpack.c.l.b16 %v1245
  %v4213 = vunpack.c.l.b16 %v1246
  %v4214 = vunpack.c.l.b16 %v1247
  %v4215 = vunpack.c.l.b16 %v1248
  %v4216 = vunpack.c.l.b16 %v1249
  %v4217 = vunpack.c.l.b16 %v1250
  %v4218 = vunpack.c.l.b16 %v1251
  %v4219 = vunpack.c.l.b16 %v1252
  %v4220 = vunpack.c.l.b16 %v1253
  %v4221 = vunpack.c.l.b16 %v1254
  %v4222 = vunpack.c.l.b16 %v1255
  %v4223 = vunpack.c.l.b16 %v1256
  %v4224 = vunpack.c.l.b16 %v1257
  %v4225 = vunpack.c.l.b16 %v1258
  %v4226 = vunpack.c.l.b16 %v1259
  %v4227 = vunpack.c.l.b16 %v1260
  %v4228 = vunpack.c.l.b16 %v1261
  %v4229 = vunpack.c.l.b16 %v1262
  %v4230 = vunpack.c.l.b16 %v1263
  %v4231 = vunpack.c.l.b16 %v1264
  %v4232 = vunpack.c.l.b16 %v1265
  %v4233 = vunpack.c.l.b16 %v1266
  %v4234 = vunpack.c.l.b16 %v1267
  %v4235 = vunpack.c.l.b16 %v1268
  %v4236 = vunpack.c.l.b16 %v1269
  %v4237 = vunpack.c.l.b16 %v1270
  %v4238 = vunpack.c.l.b16 %v1271
  %v4239 = vunpack.c.l.b16 %v1272
  %v4240 = vunpack.c.l.b16 %v1273
  %v4241 = vunpack.c.l.b16 %v1274
  %v4242 = vunpack.c.l.b16 %v1275
  %v4243 = vunpack.c.l.b16 %v1276
  %v4244 = vunpack.c.l.b16 %v1277
  %v4245 = vunpack.c.l.b16 %v1278
  %v4246 = vunpack.c.l.b16 %v1279
  %v4247 = vunpack.c.l.b16 %v1280
  %v4248 = vunpack.c.l.b16 %v1281
  %v4249 = vunpack.c.l.b16 %v1282
  %v4250 = vunpack.c.l.b16 %v1283
  %v4251 = vunpack.c.l.b16 %v1284
  %v4252 = vunpack.c.l.b16 %v1285
  %v4253 = vunpack.c.l.b16 %v1286
  %v4254 = vunpack.c.l.b16 %v1287
  %v4255 = vunpack.c.l.b16 %v1288
  %v4256 = vunpack.c.l.b16 %v1289
  %v4257 = vunpack.c.l.b16 %v1290
  %v4258 = vunpack.c.l.b16 %v1291
  %v4259 = vunpack.c.l.b16 %v1292
  %v4260 = vunpack.c.l.b16 %v1293
  %v4261 = vunpack.c.l.b16 %v1294
  %v4262 = vunpack.c.l.b16 %v1295
  %v4263 = vunpack.c.l.b16 %v1296
  %v4264 = vunpack.c.l.b16 %v1297
  %v4265 = vunpack.c.l.b16 %v1298
  %v4266 = vunpack.c.l.b16 %v1299
  %v4267 = vunpack.c.l.b16 %v1300
  %v4268 = vunpack.c.l.b16 %v1301
  %v4269 = vunpack.c.l.b16 %v1302
  %v4270 = vunpack.c.l.b16 %v1303
  %v4271 = vunpack.c.l.b16 %v1304
  %v4272 = vunpack.c.l.b16 %v1305
  %v4273 = vunpack.c.l.b16 %v1306
  %v4274 = vunpack.c.l.b16 %v1307
  %v4275 = vunpack.c.l.b16 %v1308
  %v4276 = vunpack.c.l.b16 %v1309
  %v4277 = vunpack.c.l.b16 %v1310
  %v4278 = vunpack.c.l.b16 %v1311
  %v4279 = vunpack.c.l.b16 %v1312
  %v4280 = vunpack.c.l.b16 %v1313
  %v4281 = vunpack.c.l.b16 %v1314
  %v4282 = vunpack.c.l.b16 %v1315
  %v4283 = vunpack.c.l.b16 %v1316
  %v4284 = vunpack.c.l.b16 %v1317
  %v4285 = vunpack.c.l.b16 %v1318
  %v4286 = vunpack.c.l.b16 %v1319
  %v4287 = vunpack.c.l.b16 %v1320
  %v4288 = vunpack.c.l.b16 %v1321
  %v4289 = vunpack.c.l.b16 %v1322
  %v4290 = vunpack.c.l.b16 %v1323
  %v4291 = vunpack.c.l.b16 %v1324
  %v4292 = vunpack.c.l.b16 %v1325
  %v4293 = vunpack.c.l.b16 %v1326
  %v4294 = vunpack.c.l.b16 %v1327
  %v4295 = vunpack.c.l.b16 %v1328
  %v4296 = vunpack.c.l.b16 %v1329
  %v4297 = vunpack.c.l.b16 %v1330
  %v4298 = vunpack.c.l.b16 %v1331
  %v4299 = vunpack.c.l.b16 %v1332
  %v4300 = vunpack.c.l.b16 %v1333
  %v4301 = vunpack.c.l.b16 %v1334
  %v4302 = vunpack.c.l.b16 %v1335
  %v4303 = vunpack.c.l.b16 %v1336
  %v4304 = vunpack.c.l.b16 %v1337
  %v4305 = vunpack.c.l.b16 %v1338
  %v4306 = vunpack.c.l.b16 %v1339
  %v4307 = vunpack.c.l.b16 %v1340
  %v4308 = vunpack.c.l.b16 %v1341
  %v4309 = vunpack.c.l.b16 %v1342
  %v4310 = vunpack.c.l.b16 %v1343
  %v4311 = vunpack.c.l.b16 %v1344
  %v4312 = vunpack.c.l.b16 %v1345
  %v4313 = vunpack.c.l.b16 %v1346
  %v4314 = vunpack.c.l.b16 %v1347
  %v4315 = vunpack.c.l.b16 %v1348
  %v4316 = vunpack.c.l.b16 %v1349
  %v4317 = vunpack.c.l.b16 %v1350
  %v4318 = vunpack.c.l.b16 %v1351
  %v4319 = vunpack.c.l.b16 %v1352
  %v4320 = vunpack.c.l.b16 %v1353
  %v4321 = vunpack.c.l.b16 %v1354
  %v4322 = vunpack.c.l.b16 %v1355
  %v4323 = vunpack.c.l.b16 %v1356
  %v4324 = vunpack.c.l.b16 %v1357
  %v4325 = vunpack.c.l.b16 %v1358
  %v4326 = vunpack.c.l.b16 %v1359
  %v4327 = vunpack.c.l.b16 %v1360
  %v4328 = vunpack.c.l.b16 %v1361
  %v4329 = vunpack.c.l.b16 %v1362
  %v4330 = vunpack.c.l.b16 %v1363
  %v4331 = vunpack.c.l.b16 %v1364
  %v4332 = vunpack.c.l.b16 %v1365
  %v4333 = vunpack.c.l.b16 %v1366
  %v4334 = vunpack.c.l.b16 %v1367
  %v4335 = vunpack.c.l.b16 %v1368
  %v4336 = vunpack.c.l.b16 %v1369
  %v4337 = vunpack.c.l.b16 %v1370
  %v4338 = vunpack.c.l.b16 %v1371
  %v4339 = vunpack.c.l.b16 %v1372
  %v4340 = vunpack.c.l.b16 %v1373
  %v4341 = vunpack.c.l.b16 %v1374
  %v4342 = vunpack.c.l.b16 %v1375
  %v4343 = vunpack.c.l.b16 %v1376
  %v4344 = vunpack.c.l.b16 %v1377
  %v4345 = vunpack.c.l.b16 %v1378
  %v4346 = vunpack.c.l.b16 %v1379
  %v4347 = vunpack.c.l.b16 %v1380
  %v4348 = vunpack.c.l.b16 %v1381
  %v4349 = vunpack.c.l.b16 %v1382
  %v4350 = vunpack.c.l.b16 %v1383
  %v4351 = vunpack.c.l.b16 %v1384
  %v4352 = vunpack.c.l.b16 %v1385
  %v4353 = vunpack.c.l.b16 %v1386
  %v4354 = vpack.c.b16 %v3075, %v3074
  %v4355 = vpack.c.b16 %v3077, %v3076
  %v4356 = vpack.c.b16 %v3079, %v3078
  %v4357 = vpack.c.b16 %v3081, %v3080
  %v4358 = vpack.c.b16 %v3083, %v3082
  %v4359 = vpack.c.b16 %v3085, %v3084
  %v4360 = vpack.c.b16 %v3087, %v3086
  %v4361 = vpack.c.b16 %v3089, %v3088
  %v4362 = vpack.c.b16 %v3091, %v3090
  %v4363 = vpack.c.b16 %v3093, %v3092
  %v4364 = vpack.c.b16 %v3095, %v3094
  %v4365 = vpack.c.b16 %v3097, %v3096
  %v4366 = vpack.c.b16 %v3099, %v3098
  %v4367 = vpack.c.b16 %v3101, %v3100
  %v4368 = vpack.c.b16 %v3103, %v3102
  %v4369 = vpack.c.b16 %v3105, %v3104
  %v4370 = vpack.c.b16 %v3107, %v3106
  %v4371 = vpack.c.b16 %v3109, %v3108
  %v4372 = vpack.c.b16 %v3111, %v3110
  %v4373 = vpack.c.b16 %v3113, %v3112
  %v4374 = vpack.c.b16 %v3115, %v3114
  %v4375 = vpack.c.b16 %v3117, %v3116
  %v4376 = vpack.c.b16 %v3119, %v3118
  %v4377 = vpack.c.b16 %v3121, %v3120
  %v4378 = vpack.c.b16 %v3123, %v3122
  %v4379 = vpack.c.b16 %v3125, %v3124
  %v4380 = vpack.c.b16 %v3127, %v3126
  %v4381 = vpack.c.b16 %v3129, %v3128
  %v4382 = vpack.c.b16 %v3131, %v3130
  %v4383 = vpack.c.b16 %v3133, %v3132
  %v4384 = vpack.c.b16 %v3135, %v3134
  %v4385 = vpack.c.b16 %v3137, %v3136
  %v4386 = vpack.c.b16 %v3139, %v3138
  %v4387 = vpack.c.b16 %v3141, %v3140
  %v4388 = vpack.c.b16 %v3143, %v3142
  %v4389 = vpack.c.b16 %v3145, %v3144
  %v4390 = vpack.c.b16 %v3147, %v3146
  %v4391 = vpack.c.b16 %v3149, %v3148
  %v4392 = vpack.c.b16 %v3151, %v3150
  %v4393 = vpack.c.b16 %v3153, %v3152
  %v4394 = vpack.c.b16 %v3155, %v3154
  %v4395 = vpack.c.b16 %v3157, %v3156
  %v4396 = vpack.c.b16 %v3159, %v3158
  %v4397 = vpack.c.b16 %v3161, %v3160
  %v4398 = vpack.c.b16 %v3163, %v3162
  %v4399 = vpack.c.b16 %v3165, %v3164
  %v4400 = vpack.c.b16 %v3167, %v3166
  %v4401 = vpack.c.b16 %v3169, %v3168
  %v4402 = vpack.c.b16 %v3171, %v3170
  %v4403 = vpack.c.b16 %v3173, %v3172
  %v4404 = vpack.c.b16 %v3175, %v3174
  %v4405 = vpack.c.b16 %v3177, %v3176
  %v4406 = vpack.c.b16 %v3179, %v3178
  %v4407 = vpack.c.b16 %v3181, %v3180
  %v4408 = vpack.c.b16 %v3183, %v3182
  %v4409 = vpack.c.b16 %v3185, %v3184
  %v4410 = vpack.c.b16 %v3187, %v3186
  %v4411 = vpack.c.b16 %v3189, %v3188
  %v4412 = vpack.c.b16 %v3191, %v3190
  %v4413 = vpack.c.b16 %v3193, %v3192
  %v4414 = vpack.c.b16 %v3195, %v3194
  %v4415 = vpack.c.b16 %v3197, %v3196
  %v4416 = vpack.c.b16 %v3199, %v3198
  %v4417 = vpack.c.b16 %v3201, %v3200
  %v4418 = vpack.c.b16 %v3203, %v3202
  %v4419 = vpack.c.b16 %v3205, %v3204
  %v4420 = vpack.c.b16 %v3207, %v3206
  %v4421 = vpack.c.b16 %v3209, %v3208
  %v4422 = vpack.c.b16 %v3211, %v3210
  %v4423 = vpack.c.b16 %v3213, %v3212
  %v4424 = vpack.c.b16 %v3215, %v3214
  %v4425 = vpack.c.b16 %v3217, %v3216
  %v4426 = vpack.c.b16 %v3219, %v3218
  %v4427 = vpack.c.b16 %v3221, %v3220
  %v4428 = vpack.c.b16 %v3223, %v3222
  %v4429 = vpack.c.b16 %v3225, %v3224
  %v4430 = vpack.c.b16 %v3227, %v3226
  %v4431 = vpack.c.b16 %v3229, %v3228
  %v4432 = vpack.c.b16 %v3231, %v3230
  %v4433 = vpack.c.b16 %v3233, %v3232
  %v4434 = vpack.c.b16 %v3235, %v3234
  %v4435 = vpack.c.b16 %v3237, %v3236
  %v4436 = vpack.c.b16 %v3239, %v3238
  %v4437 = vpack.c.b16 %v3241, %v3240
  %v4438 = vpack.c.b16 %v3243, %v3242
  %v4439 = vpack.c.b16 %v3245, %v3244
  %v4440 = vpack.c.b16 %v3247, %v3246
  %v4441 = vpack.c.b16 %v3249, %v3248
  %v4442 = vpack.c.b16 %v3251, %v3250
  %v4443 = vpack.c.b16 %v3253, %v3252
  %v4444 = vpack.c.b16 %v3255, %v3254
  %v4445 = vpack.c.b16 %v3257, %v3256
  %v4446 = vpack.c.b16 %v3259, %v3258
  %v4447 = vpack.c.b16 %v3261, %v3260
  %v4448 = vpack.c.b16 %v3263, %v3262
  %v4449 = vpack.c.b16 %v3265, %v3264
  %v4450 = vpack.c.b16 %v3267, %v3266
  %v4451 = vpack.c.b16 %v3269, %v3268
  %v4452 = vpack.c.b16 %v3271, %v3270
  %v4453 = vpack.c.b16 %v3273, %v3272
  %v4454 = vpack.c.b16 %v3275, %v3274
  %v4455 = vpack.c.b16 %v3277, %v3276
  %v4456 = vpack.c.b16 %v3279, %v3278
  %v4457 = vpack.c.b16 %v3281, %v3280
  %v4458 = vpack.c.b16 %v3283, %v3282
  %v4459 = vpack.c.b16 %v3285, %v3284
  %v4460 = vpack.c.b16 %v3287, %v3286
  %v4461 = vpack.c.b16 %v3289, %v3288
  %v4462 = vpack.c.b16 %v3291, %v3290
  %v4463 = vpack.c.b16 %v3293, %v3292
  %v4464 = vpack.c.b16 %v3295, %v3294
  %v4465 = vpack.c.b16 %v3297, %v3296
  %v4466 = vpack.c.b16 %v3299, %v3298
  %v4467 = vpack.c.b16 %v3301, %v3300
  %v4468 = vpack.c.b16 %v3303, %v3302
  %v4469 = vpack.c.b16 %v3305, %v3304
  %v4470 = vpack.c.b16 %v3307, %v3306
  %v4471 = vpack.c.b16 %v3309, %v3308
  %v4472 = vpack.c.b16 %v3311, %v3310
  %v4473 = vpack.c.b16 %v3313, %v3312
  %v4474 = vpack.c.b16 %v3315, %v3314
  %v4475 = vpack.c.b16 %v3317, %v3316
  %v4476 = vpack.c.b16 %v3319, %v3318
  %v4477 = vpack.c.b16 %v3321, %v3320
  %v4478 = vpack.c.b16 %v3323, %v3322
  %v4479 = vpack.c.b16 %v3325, %v3324
  %v4480 = vpack.c.b16 %v3327, %v3326
  %v4481 = vpack.c.b16 %v3329, %v3328
  %v4482 = vpack.c.b16 %v3331, %v3330
  %v4483 = vpack.c.b16 %v3333, %v3332
  %v4484 = vpack.c.b16 %v3335, %v3334
  %v4485 = vpack.c.b16 %v3337, %v3336
  %v4486 = vpack.c.b16 %v3339, %v3338
  %v4487 = vpack.c.b16 %v3341, %v3340
  %v4488 = vpack.c.b16 %v3343, %v3342
  %v4489 = vpack.c.b16 %v3345, %v3344
  %v4490 = vpack.c.b16 %v3347, %v3346
  %v4491 = vpack.c.b16 %v3349, %v3348
  %v4492 = vpack.c.b16 %v3351, %v3350
  %v4493 = vpack.c.b16 %v3353, %v3352
  %v4494 = vpack.c.b16 %v3355, %v3354
  %v4495 = vpack.c.b16 %v3357, %v3356
  %v4496 = vpack.c.b16 %v3359, %v3358
  %v4497 = vpack.c.b16 %v3361, %v3360
  %v4498 = vpack.c.b16 %v3363, %v3362
  %v4499 = vpack.c.b16 %v3365, %v3364
  %v4500 = vpack.c.b16 %v3367, %v3366
  %v4501 = vpack.c.b16 %v3369, %v3368
  %v4502 = vpack.c.b16 %v3371, %v3370
  %v4503 = vpack.c.b16 %v3373, %v3372
  %v4504 = vpack.c.b16 %v3375, %v3374
  %v4505 = vpack.c.b16 %v3377, %v3376
  %v4506 = vpack.c.b16 %v3379, %v3378
  %v4507 = vpack.c.b16 %v3381, %v3380
  %v4508 = vpack.c.b16 %v3383, %v3382
  %v4509 = vpack.c.b16 %v3385, %v3384
  %v4510 = vpack.c.b16 %v3387, %v3386
  %v4511 = vpack.c.b16 %v3389, %v3388
  %v4512 = vpack.c.b16 %v3391, %v3390
  %v4513 = vpack.c.b16 %v3393, %v3392
  %v4514 = vpack.c.b16 %v3395, %v3394
  %v4515 = vpack.c.b16 %v3397, %v3396
  %v4516 = vpack.c.b16 %v3399, %v3398
  %v4517 = vpack.c.b16 %v3401, %v3400
  %v4518 = vpack.c.b16 %v3403, %v3402
  %v4519 = vpack.c.b16 %v3405, %v3404
  %v4520 = vpack.c.b16 %v3407, %v3406
  %v4521 = vpack.c.b16 %v3409, %v3408
  %v4522 = vpack.c.b16 %v3411, %v3410
  %v4523 = vpack.c.b16 %v3413, %v3412
  %v4524 = vpack.c.b16 %v3415, %v3414
  %v4525 = vpack.c.b16 %v3417, %v3416
  %v4526 = vpack.c.b16 %v3419, %v3418
  %v4527 = vpack.c.b16 %v3421, %v3420
  %v4528 = vpack.c.b16 %v3423, %v3422
  %v4529 = vpack.c.b16 %v3425, %v3424
  %v4530 = vpack.c.b16 %v3427, %v3426
  %v4531 = vpack.c.b16 %v3429, %v3428
  %v4532 = vpack.c.b16 %v3431, %v3430
  %v4533 = vpack.c.b16 %v3433, %v3432
  %v4534 = vpack.c.b16 %v3435, %v3434
  %v4535 = vpack.c.b16 %v3437, %v3436
  %v4536 = vpack.c.b16 %v3439, %v3438
  %v4537 = vpack.c.b16 %v3441, %v3440
  %v4538 = vpack.c.b16 %v3443, %v3442
  %v4539 = vpack.c.b16 %v3445, %v3444
  %v4540 = vpack.c.b16 %v3447, %v3446
  %v4541 = vpack.c.b16 %v3449, %v3448
  %v4542 = vpack.c.b16 %v3451, %v3450
  %v4543 = vpack.c.b16 %v3453, %v3452
  %v4544 = vpack.c.b16 %v3455, %v3454
  %v4545 = vpack.c.b16 %v3457, %v3456
  %v4546 = vpack.c.b16 %v3459, %v3458
  %v4547 = vpack.c.b16 %v3461, %v3460
  %v4548 = vpack.c.b16 %v3463, %v3462
  %v4549 = vpack.c.b16 %v3465, %v3464
  %v4550 = vpack.c.b16 %v3467, %v3466
  %v4551 = vpack.c.b16 %v3469, %v3468
  %v4552 = vpack.c.b16 %v3471, %v3470
  %v4553 = vpack.c.b16 %v3473, %v3472
  %v4554 = vpack.c.b16 %v3475, %v3474
  %v4555 = vpack.c.b16 %v3477, %v3476
  %v4556 = vpack.c.b16 %v3479, %v3478
  %v4557 = vpack.c.b16 %v3481, %v3480
  %v4558 = vpack.c.b16 %v3483, %v3482
  %v4559 = vpack.c.b16 %v3485, %v3484
  %v4560 = vpack.c.b16 %v3487, %v3486
  %v4561 = vpack.c.b16 %v3489, %v3488
  %v4562 = vpack.c.b16 %v3491, %v3490
  %v4563 = vpack.c.b16 %v3493, %v3492
  %v4564 = vpack.c.b16 %v3495, %v3494
  %v4565 = vpack.c.b16 %v3497, %v3496
  %v4566 = vpack.c.b16 %v3499, %v3498
  %v4567 = vpack.c.b16 %v3501, %v3500
  %v4568 = vpack.c.b16 %v3503, %v3502
  %v4569 = vpack.c.b16 %v3505, %v3504
  %v4570 = vpack.c.b16 %v3507, %v3506
  %v4571 = vpack.c.b16 %v3509, %v3508
  %v4572 = vpack.c.b16 %v3511, %v3510
  %v4573 = vpack.c.b16 %v3513, %v3512
  %v4574 = vpack.c.b16 %v3515, %v3514
  %v4575 = vpack.c.b16 %v3517, %v3516
  %v4576 = vpack.c.b16 %v3519, %v3518
  %v4577 = vpack.c.b16 %v3521, %v3520
  %v4578 = vpack.c.b16 %v3523, %v3522
  %v4579 = vpack.c.b16 %v3525, %v3524
  %v4580 = vpack.c.b16 %v3527, %v3526
  %v4581 = vpack.c.b16 %v3529, %v3528
  %v4582 = vpack.c.b16 %v3531, %v3530
  %v4583 = vpack.c.b16 %v3533, %v3532
  %v4584 = vpack.c.b16 %v3535, %v3534
  %v4585 = vpack.c.b16 %v3537, %v3536
  %v4586 = vpack.c.b16 %v3539, %v3538
  %v4587 = vpack.c.b16 %v3541, %v3540
  %v4588 = vpack.c.b16 %v3543, %v3542
  %v4589 = vpack.c.b16 %v3545, %v3544
  %v4590 = vpack.c.b16 %v3547, %v3546
  %v4591 = vpack.c.b16 %v3549, %v3548
  %v4592 = vpack.c.b16 %v3551, %v3550
  %v4593 = vpack.c.b16 %v3553, %v3552
  %v4594 = vpack.c.b16 %v3555, %v3554
  %v4595 = vpack.c.b16 %v3557, %v3556
  %v4596 = vpack.c.b16 %v3559, %v3558
  %v4597 = vpack.c.b16 %v3561, %v3560
  %v4598 = vpack.c.b16 %v3563, %v3562
  %v4599 = vpack.c.b16 %v3565, %v3564
  %v4600 = vpack.c.b16 %v3567, %v3566
  %v4601 = vpack.c.b16 %v3569, %v3568
  %v4602 = vpack.c.b16 %v3571, %v3570
  %v4603 = vpack.c.b16 %v3573, %v3572
  %v4604 = vpack.c.b16 %v3575, %v3574
  %v4605 = vpack.c.b16 %v3577, %v3576
  %v4606 = vpack.c.b16 %v3579, %v3578
  %v4607 = vpack.c.b16 %v3581, %v3580
  %v4608 = vpack.c.b16 %v3583, %v3582
  %v4609 = vpack.c.b16 %v3585, %v3584
  %v4610 = vpack.c.b16 %v3587, %v3586
  %v4611 = vpack.c.b16 %v3589, %v3588
  %v4612 = vpack.c.b16 %v3591, %v3590
  %v4613 = vpack.c.b16 %v3593, %v3592
  %v4614 = vpack.c.b16 %v3595, %v3594
  %v4615 = vpack.c.b16 %v3597, %v3596
  %v4616 = vpack.c.b16 %v3599, %v3598
  %v4617 = vpack.c.b16 %v3601, %v3600
  %v4618 = vpack.c.b16 %v3603, %v3602
  %v4619 = vpack.c.b16 %v3605, %v3604
  %v4620 = vpack.c.b16 %v3607, %v3606
  %v4621 = vpack.c.b16 %v3609, %v3608
  %v4622 = vpack.c.b16 %v3611, %v3610
  %v4623 = vpack.c.b16 %v3613, %v3612
  %v4624 = vpack.c.b16 %v3615, %v3614
  %v4625 = vpack.c.b16 %v3617, %v3616
  %v4626 = vpack.c.b16 %v3619, %v3618
  %v4627 = vpack.c.b16 %v3621, %v3620
  %v4628 = vpack.c.b16 %v3623, %v3622
  %v4629 = vpack.c.b16 %v3625, %v3624
  %v4630 = vpack.c.b16 %v3627, %v3626
  %v4631 = vpack.c.b16 %v3629, %v3628
  %v4632 = vpack.c.b16 %v3631, %v3630
  %v4633 = vpack.c.b16 %v3633, %v3632
  %v4634 = vpack.c.b16 %v3635, %v3634
  %v4635 = vpack.c.b16 %v3637, %v3636
  %v4636 = vpack.c.b16 %v3639, %v3638
  %v4637 = vpack.c.b16 %v3641, %v3640
  %v4638 = vpack.c.b16 %v3643, %v3642
  %v4639 = vpack.c.b16 %v3645, %v3644
  %v4640 = vpack.c.b16 %v3647, %v3646
  %v4641 = vpack.c.b16 %v3649, %v3648
  %v4642 = vpack.c.b16 %v3651, %v3650
  %v4643 = vpack.c.b16 %v3653, %v3652
  %v4644 = vpack.c.b16 %v3655, %v3654
  %v4645 = vpack.c.b16 %v3657, %v3656
  %v4646 = vpack.c.b16 %v3659, %v3658
  %v4647 = vpack.c.b16 %v3661, %v3660
  %v4648 = vpack.c.b16 %v3663, %v3662
  %v4649 = vpack.c.b16 %v3665, %v3664
  %v4650 = vpack.c.b16 %v3667, %v3666
  %v4651 = vpack.c.b16 %v3669, %v3668
  %v4652 = vpack.c.b16 %v3671, %v3670
  %v4653 = vpack.c.b16 %v3673, %v3672
  %v4654 = vpack.c.b16 %v3675, %v3674
  %v4655 = vpack.c.b16 %v3677, %v3676
  %v4656 = vpack.c.b16 %v3679, %v3678
  %v4657 = vpack.c.b16 %v3681, %v3680
  %v4658 = vpack.c.b16 %v3683, %v3682
  %v4659 = vpack.c.b16 %v3685, %v3684
  %v4660 = vpack.c.b16 %v3687, %v3686
  %v4661 = vpack.c.b16 %v3689, %v3688
  %v4662 = vpack.c.b16 %v3691, %v3690
  %v4663 = vpack.c.b16 %v3693, %v3692
  %v4664 = vpack.c.b16 %v3695, %v3694
  %v4665 = vpack.c.b16 %v3697, %v3696
  %v4666 = vpack.c.b16 %v3699, %v3698
  %v4667 = vpack.c.b16 %v3701, %v3700
  %v4668 = vpack.c.b16 %v3703, %v3702
  %v4669 = vpack.c.b16 %v3705, %v3704
  %v4670 = vpack.c.b16 %v3707, %v3706
  %v4671 = vpack.c.b16 %v3709, %v3708
  %v4672 = vpack.c.b16 %v3711, %v3710
  %v4673 = vpack.c.b16 %v3713, %v3712
  %v4674 = vpack.c.b16 %v3715, %v3714
  %v4675 = vpack.c.b16 %v3717, %v3716
  %v4676 = vpack.c.b16 %v3719, %v3718
  %v4677 = vpack.c.b16 %v3721, %v3720
  %v4678 = vpack.c.b16 %v3723, %v3722
  %v4679 = vpack.c.b16 %v3725, %v3724
  %v4680 = vpack.c.b16 %v3727, %v3726
  %v4681 = vpack.c.b16 %v3729, %v3728
  %v4682 = vpack.c.b16 %v3731, %v3730
  %v4683 = vpack.c.b16 %v3733, %v3732
  %v4684 = vpack.c.b16 %v3735, %v3734
  %v4685 = vpack.c.b16 %v3737, %v3736
  %v4686 = vpack.c.b16 %v3739, %v3738
  %v4687 = vpack.c.b16 %v3741, %v3740
  %v4688 = vpack.c.b16 %v3743, %v3742
  %v4689 = vpack.c.b16 %v3745, %v3744
  %v4690 = vpack.c.b16 %v3747, %v3746
  %v4691 = vpack.c.b16 %v3749, %v3748
  %v4692 = vpack.c.b16 %v3751, %v3750
  %v4693 = vpack.c.b16 %v3753, %v3752
  %v4694 = vpack.c.b16 %v3755, %v3754
  %v4695 = vpack.c.b16 %v3757, %v3756
  %v4696 = vpack.c.b16 %v3759, %v3758
  %v4697 = vpack.c.b16 %v3761, %v3760
  %v4698 = vpack.c.b16 %v3763, %v3762
  %v4699 = vpack.c.b16 %v3765, %v3764
  %v4700 = vpack.c.b16 %v3767, %v3766
  %v4701 = vpack.c.b16 %v3769, %v3768
  %v4702 = vpack.c.b16 %v3771, %v3770
  %v4703 = vpack.c.b16 %v3773, %v3772
  %v4704 = vpack.c.b16 %v3775, %v3774
  %v4705 = vpack.c.b16 %v3777, %v3776
  %v4706 = vpack.c.b16 %v3779, %v3778
  %v4707 = vpack.c.b16 %v3781, %v3780
  %v4708 = vpack.c.b16 %v3783, %v3782
  %v4709 = vpack.c.b16 %v3785, %v3784
  %v4710 = vpack.c.b16 %v3787, %v3786
  %v4711 = vpack.c.b16 %v3789, %v3788
  %v4712 = vpack.c.b16 %v3791, %v3790
  %v4713 = vpack.c.b16 %v3793, %v3792
  %v4714 = vpack.c.b16 %v3795, %v3794
  %v4715 = vpack.c.b16 %v3797, %v3796
  %v4716 = vpack.c.b16 %v3799, %v3798
  %v4717 = vpack.c.b16 %v3801, %v3800
  %v4718 = vpack.c.b16 %v3803, %v3802
  %v4719 = vpack.c.b16 %v3805, %v3804
  %v4720 = vpack.c.b16 %v3807, %v3806
  %v4721 = vpack.c.b16 %v3809, %v3808
  %v4722 = vpack.c.b16 %v3811, %v3810
  %v4723 = vpack.c.b16 %v3813, %v3812
  %v4724 = vpack.c.b16 %v3815, %v3814
  %v4725 = vpack.c.b16 %v3817, %v3816
  %v4726 = vpack.c.b16 %v3819, %v3818
  %v4727 = vpack.c.b16 %v3821, %v3820
  %v4728 = vpack.c.b16 %v3823, %v3822
  %v4729 = vpack.c.b16 %v3825, %v3824
  %v4730 = vpack.c.b16 %v3827, %v3826
  %v4731 = vpack.c.b16 %v3829, %v3828
  %v4732 = vpack.c.b16 %v3831, %v3830
  %v4733 = vpack.c.b16 %v3833, %v3832
  %v4734 = vpack.c.b16 %v3835, %v3834
  %v4735 = vpack.c.b16 %v3837, %v3836
  %v4736 = vpack.c.b16 %v3839, %v3838
  %v4737 = vpack.c.b16 %v3841, %v3840
  %v4738 = vpack.c.b16 %v3843, %v3842
  %v4739 = vpack.c.b16 %v3845, %v3844
  %v4740 = vpack.c.b16 %v3847, %v3846
  %v4741 = vpack.c.b16 %v3849, %v3848
  %v4742 = vpack.c.b16 %v3851, %v3850
  %v4743 = vpack.c.b16 %v3853, %v3852
  %v4744 = vpack.c.b16 %v3855, %v3854
  %v4745 = vpack.c.b16 %v3857, %v3856
  %v4746 = vpack.c.b16 %v3859, %v3858
  %v4747 = vpack.c.b16 %v3861, %v3860
  %v4748 = vpack.c.b16 %v3863, %v3862
  %v4749 = vpack.c.b16 %v3865, %v3864
  %v4750 = vpack.c.b16 %v3867, %v3866
  %v4751 = vpack.c.b16 %v3869, %v3868
  %v4752 = vpack.c.b16 %v3871, %v3870
  %v4753 = vpack.c.b16 %v3873, %v3872
  %v4754 = vpack.c.b16 %v3875, %v3874
  %v4755 = vpack.c.b16 %v3877, %v3876
  %v4756 = vpack.c.b16 %v3879, %v3878
  %v4757 = vpack.c.b16 %v3881, %v3880
  %v4758 = vpack.c.b16 %v3883, %v3882
  %v4759 = vpack.c.b16 %v3885, %v3884
  %v4760 = vpack.c.b16 %v3887, %v3886
  %v4761 = vpack.c.b16 %v3889, %v3888
  %v4762 = vpack.c.b16 %v3891, %v3890
  %v4763 = vpack.c.b16 %v3893, %v3892
  %v4764 = vpack.c.b16 %v3895, %v3894
  %v4765 = vpack.c.b16 %v3897, %v3896
  %v4766 = vpack.c.b16 %v3899, %v3898
  %v4767 = vpack.c.b16 %v3901, %v3900
  %v4768 = vpack.c.b16 %v3903, %v3902
  %v4769 = vpack.c.b16 %v3905, %v3904
  %v4770 = vpack.c.b16 %v3907, %v3906
  %v4771 = vpack.c.b16 %v3909, %v3908
  %v4772 = vpack.c.b16 %v3911, %v3910
  %v4773 = vpack.c.b16 %v3913, %v3912
  %v4774 = vpack.c.b16 %v3915, %v3914
  %v4775 = vpack.c.b16 %v3917, %v3916
  %v4776 = vpack.c.b16 %v3919, %v3918
  %v4777 = vpack.c.b16 %v3921, %v3920
  %v4778 = vpack.c.b16 %v3923, %v3922
  %v4779 = vpack.c.b16 %v3925, %v3924
  %v4780 = vpack.c.b16 %v3927, %v3926
  %v4781 = vpack.c.b16 %v3929, %v3928
  %v4782 = vpack.c.b16 %v3931, %v3930
  %v4783 = vpack.c.b16 %v3933, %v3932
  %v4784 = vpack.c.b16 %v3935, %v3934
  %v4785 = vpack.c.b16 %v3937, %v3936
  %v4786 = vpack.c.b16 %v3939, %v3938
  %v4787 = vpack.c.b16 %v3941, %v3940
  %v4788 = vpack.c.b16 %v3943, %v3942
  %v4789 = vpack.c.b16 %v3945, %v3944
  %v4790 = vpack.c.b16 %v3947, %v3946
  %v4791 = vpack.c.b16 %v3949, %v3948
  %v4792 = vpack.c.b16 %v3951, %v3950
  %v4793 = vpack.c.b16 %v3953, %v3952
  %v4794 = vpack.c.b16 %v3955, %v3954
  %v4795 = vpack.c.b16 %v3957, %v3956
  %v4796 = vpack.c.b16 %v3959, %v3958
  %v4797 = vpack.c.b16 %v3961, %v3960
  %v4798 = vpack.c.b16 %v3963, %v3962
  %v4799 = vpack.c.b16 %v3965, %v3964
  %v4800 = vpack.c.b16 %v3967, %v3966
  %v4801 = vpack.c.b16 %v3969, %v3968
  %v4802 = vpack.c.b16 %v3971, %v3970
  %v4803 = vpack.c.b16 %v3973, %v3972
  %v4804 = vpack.c.b16 %v3975, %v3974
  %v4805 = vpack.c.b16 %v3977, %v3976
  %v4806 = vpack.c.b16 %v3979, %v3978
  %v4807 = vpack.c.b16 %v3981, %v3980
  %v4808 = vpack.c.b16 %v3983, %v3982
  %v4809 = vpack.c.b16 %v3985, %v3984
  %v4810 = vpack.c.b16 %v3987, %v3986
  %v4811 = vpack.c.b16 %v3989, %v3988
  %v4812 = vpack.c.b16 %v3991, %v3990
  %v4813 = vpack.c.b16 %v3993, %v3992
  %v4814 = vpack.c.b16 %v3995, %v3994
  %v4815 = vpack.c.b16 %v3997, %v3996
  %v4816 = vpack.c.b16 %v3999, %v3998
  %v4817 = vpack.c.b16 %v4001, %v4000
  %v4818 = vpack.c.b16 %v4003, %v4002
  %v4819 = vpack.c.b16 %v4005, %v4004
  %v4820 = vpack.c.b16 %v4007, %v4006
  %v4821 = vpack.c.b16 %v4009, %v4008
  %v4822 = vpack.c.b16 %v4011, %v4010
  %v4823 = vpack.c.b16 %v4013, %v4012
  %v4824 = vpack.c.b16 %v4015, %v4014
  %v4825 = vpack.c.b16 %v4017, %v4016
  %v4826 = vpack.c.b16 %v4019, %v4018
  %v4827 = vpack.c.b16 %v4021, %v4020
  %v4828 = vpack.c.b16 %v4023, %v4022
  %v4829 = vpack.c.b16 %v4025, %v4024
  %v4830 = vpack.c.b16 %v4027, %v4026
  %v4831 = vpack.c.b16 %v4029, %v4028
  %v4832 = vpack.c.b16 %v4031, %v4030
  %v4833 = vpack.c.b16 %v4033, %v4032
  %v4834 = vpack.c.b16 %v4035, %v4034
  %v4835 = vpack.c.b16 %v4037, %v4036
  %v4836 = vpack.c.b16 %v4039, %v4038
  %v4837 = vpack.c.b16 %v4041, %v4040
  %v4838 = vpack.c.b16 %v4043, %v4042
  %v4839 = vpack.c.b16 %v4045, %v4044
  %v4840 = vpack.c.b16 %v4047, %v4046
  %v4841 = vpack.c.b16 %v4049, %v4048
  %v4842 = vpack.c.b16 %v4051, %v4050
  %v4843 = vpack.c.b16 %v4053, %v4052
  %v4844 = vpack.c.b16 %v4055, %v4054
  %v4845 = vpack.c.b16 %v4057, %v4056
  %v4846 = vpack.c.b16 %v4059, %v4058
  %v4847 = vpack.c.b16 %v4061, %v4060
  %v4848 = vpack.c.b16 %v4063, %v4062
  %v4849 = vpack.c.b16 %v4065, %v4064
  %v4850 = vpack.c.b16 %v4067, %v4066
  %v4851 = vpack.c.b16 %v4069, %v4068
  %v4852 = vpack.c.b16 %v4071, %v4070
  %v4853 = vpack.c.b16 %v4073, %v4072
  %v4854 = vpack.c.b16 %v4075, %v4074
  %v4855 = vpack.c.b16 %v4077, %v4076
  %v4856 = vpack.c.b16 %v4079, %v4078
  %v4857 = vpack.c.b16 %v4081, %v4080
  %v4858 = vpack.c.b16 %v4083, %v4082
  %v4859 = vpack.c.b16 %v4085, %v4084
  %v4860 = vpack.c.b16 %v4087, %v4086
  %v4861 = vpack.c.b16 %v4089, %v4088
  %v4862 = vpack.c.b16 %v4091, %v4090
  %v4863 = vpack.c.b16 %v4093, %v4092
  %v4864 = vpack.c.b16 %v4095, %v4094
  %v4865 = vpack.c.b16 %v4097, %v4096
  %v4866 = vpack.c.b16 %v4099, %v4098
  %v4867 = vpack.c.b16 %v4101, %v4100
  %v4868 = vpack.c.b16 %v4103, %v4102
  %v4869 = vpack.c.b16 %v4105, %v4104
  %v4870 = vpack.c.b16 %v4107, %v4106
  %v4871 = vpack.c.b16 %v4109, %v4108
  %v4872 = vpack.c.b16 %v4111, %v4110
  %v4873 = vpack.c.b16 %v4113, %v4112
  %v4874 = vpack.c.b16 %v4115, %v4114
  %v4875 = vpack.c.b16 %v4117, %v4116
  %v4876 = vpack.c.b16 %v4119, %v4118
  %v4877 = vpack.c.b16 %v4121, %v4120
  %v4878 = vpack.c.b16 %v4123, %v4122
  %v4879 = vpack.c.b16 %v4125, %v4124
  %v4880 = vpack.c.b16 %v4127, %v4126
  %v4881 = vpack.c.b16 %v4129, %v4128
  %v4882 = vpack.c.b16 %v4131, %v4130
  %v4883 = vpack.c.b16 %v4133, %v4132
  %v4884 = vpack.c.b16 %v4135, %v4134
  %v4885 = vpack.c.b16 %v4137, %v4136
  %v4886 = vpack.c.b16 %v4139, %v4138
  %v4887 = vpack.c.b16 %v4141, %v4140
  %v4888 = vpack.c.b16 %v4143, %v4142
  %v4889 = vpack.c.b16 %v4145, %v4144
  %v4890 = vpack.c.b16 %v4147, %v4146
  %v4891 = vpack.c.b16 %v4149, %v4148
  %v4892 = vpack.c.b16 %v4151, %v4150
  %v4893 = vpack.c.b16 %v4153, %v4152
  %v4894 = vpack.c.b16 %v4155, %v4154
  %v4895 = vpack.c.b16 %v4157, %v4156
  %v4896 = vpack.c.b16 %v4159, %v4158
  %v4897 = vpack.c.b16 %v4161, %v4160
  %v4898 = vpack.c.b16 %v4163, %v4162
  %v4899 = vpack.c.b16 %v4165, %v4164
  %v4900 = vpack.c.b16 %v4167, %v4166
  %v4901 = vpack.c.b16 %v4169, %v4168
  %v4902 = vpack.c.b16 %v4171, %v4170
  %v4903 = vpack.c.b16 %v4173, %v4172
  %v4904 = vpack.c.b16 %v4175, %v4174
  %v4905 = vpack.c.b16 %v4177, %v4176
  %v4906 = vpack.c.b16 %v4179, %v4178
  %v4907 = vpack.c.b16 %v4181, %v4180
  %v4908 = vpack.c.b16 %v4183, %v4182
  %v4909 = vpack.c.b16 %v4185, %v4184
  %v4910 = vpack.c.b16 %v4187, %v4186
  %v4911 = vpack.c.b16 %v4189, %v4188
  %v4912 = vpack.c.b16 %v4191, %v4190
  %v4913 = vpack.c.b16 %v4193, %v4192
  %v4914 = vpack.c.b16 %v4195, %v4194
  %v4915 = vpack.c.b16 %v4197, %v4196
  %v4916 = vpack.c.b16 %v4199, %v4198
  %v4917 = vpack.c.b16 %v4201, %v4200
  %v4918 = vpack.c.b16 %v4203, %v4202
  %v4919 = vpack.c.b16 %v4205, %v4204
  %v4920 = vpack.c.b16 %v4207, %v4206
  %v4921 = vpack.c.b16 %v4209, %v4208
  %v4922 = vpack.c.b16 %v4211, %v4210
  %v4923 = vpack.c.b16 %v4213, %v4212
  %v4924 = vpack.c.b16 %v4215, %v4214
  %v4925 = vpack.c.b16 %v4217, %v4216
  %v4926 = vpack.c.b16 %v4219, %v4218
  %v4927 = vpack.c.b16 %v4221, %v4220
  %v4928 = vpack.c.b16 %v4223, %v4222
  %v4929 = vpack.c.b16 %v4225, %v4224
  %v4930 = vpack.c.b16 %v4227, %v4226
  %v4931 = vpack.c.b16 %v4229, %v4228
  %v4932 = vpack.c.b16 %v4231, %v4230
  %v4933 = vpack.c.b16 %v4233, %v4232
  %v4934 = vpack.c.b16 %v4235, %v4234
  %v4935 = vpack.c.b16 %v4237, %v4236
  %v4936 = vpack.c.b16 %v4239, %v4238
  %v4937 = vpack.c.b16 %v4241, %v4240
  %v4938 = vpack.c.b16 %v4243, %v4242
  %v4939 = vpack.c.b16 %v4245, %v4244
  %v4940 = vpack.c.b16 %v4247, %v4246
  %v4941 = vpack.c.b16 %v4249, %v4248
  %v4942 = vpack.c.b16 %v4251, %v4250
  %v4943 = vpack.c.b16 %v4253, %v4252
  %v4944 = vpack.c.b16 %v4255, %v4254
  %v4945 = vpack.c.b16 %v4257, %v4256
  %v4946 = vpack.c.b16 %v4259, %v4258
  %v4947 = vpack.c.b16 %v4261, %v4260
  %v4948 = vpack.c.b16 %v4263, %v4262
  %v4949 = vpack.c.b16 %v4265, %v4264
  %v4950 = vpack.c.b16 %v4267, %v4266
  %v4951 = vpack.c.b16 %v4269, %v4268
  %v4952 = vpack.c.b16 %v4271, %v4270
  %v4953 = vpack.c.b16 %v4273, %v4272
  %v4954 = vpack.c.b16 %v4275, %v4274
  %v4955 = vpack.c.b16 %v4277, %v4276
  %v4956 = vpack.c.b16 %v4279, %v4278
  %v4957 = vpack.c.b16 %v4281, %v4280
  %v4958 = vpack.c.b16 %v4283, %v4282
  %v4959 = vpack.c.b16 %v4285, %v4284
  %v4960 = vpack.c.b16 %v4287, %v4286
  %v4961 = vpack.c.b16 %v4289, %v4288
  %v4962 = vpack.c.b16 %v4291, %v4290
  %v4963 = vpack.c.b16 %v4293, %v4292
  %v4964 = vpack.c.b16 %v4295, %v4294
  %v4965 = vpack.c.b16 %v4297, %v4296
  %v4966 = vpack.c.b16 %v4299, %v4298
  %v4967 = vpack.c.b16 %v4301, %v4300
  %v4968 = vpack.c.b16 %v4303, %v4302
  %v4969 = vpack.c.b16 %v4305, %v4304
  %v4970 = vpack.c.b16 %v4307, %v4306
  %v4971 = vpack.c.b16 %v4309, %v4308
  %v4972 = vpack.c.b16 %v4311, %v4310
  %v4973 = vpack.c.b16 %v4313, %v4312
  %v4974 = vpack.c.b16 %v4315, %v4314
  %v4975 = vpack.c.b16 %v4317, %v4316
  %v4976 = vpack.c.b16 %v4319, %v4318
  %v4977 = vpack.c.b16 %v4321, %v4320
  %v4978 = vpack.c.b16 %v4323, %v4322
  %v4979 = vpack.c.b16 %v4325, %v4324
  %v4980 = vpack.c.b16 %v4327, %v4326
  %v4981 = vpack.c.b16 %v4329, %v4328
  %v4982 = vpack.c.b16 %v4331, %v4330
  %v4983 = vpack.c.b16 %v4333, %v4332
  %v4984 = vpack.c.b16 %v4335, %v4334
  %v4985 = vpack.c.b16 %v4337, %v4336
  %v4986 = vpack.c.b16 %v4339, %v4338
  %v4987 = vpack.c.b16 %v4341, %v4340
  %v4988 = vpack.c.b16 %v4343, %v4342
  %v4989 = vpack.c.b16 %v4345, %v4344
  %v4990 = vpack.c.b16 %v4347, %v4346
  %v4991 = vpack.c.b16 %v4349, %v4348
  %v4992 = vpack.c.b16 %v4351, %v4350
  %v4993 = vpack.c.b16 %v4353, %v4352
  %5634 = vmatprep.subr.bf16.mxu0 0
  %5635 = vmatpush1.bf16.msra.mxu0 %v4354
  %5636 = vmatprep.subr.bf16.mxu0 0
  %5637 = vmatpush1.bf16.msra.mxu0 %v4355
  %5638 = vmatprep.subr.bf16.mxu0 0
  %5639 = vmatpush1.bf16.msra.mxu0 %v4356
  %5640 = vmatprep.subr.bf16.mxu0 0
  %5641 = vmatpush1.bf16.msra.mxu0 %v4357
  %5642 = vmatprep.subr.bf16.mxu0 0
  %5643 = vmatpush1.bf16.msra.mxu0 %v4358
  %5644 = vmatprep.subr.bf16.mxu0 0
  %5645 = vmatpush1.bf16.msra.mxu0 %v4359
  %5646 = vmatprep.subr.bf16.mxu0 0
  %5647 = vmatpush1.bf16.msra.mxu0 %v4360
  %5648 = vmatprep.subr.bf16.mxu0 0
  %5649 = vmatpush1.bf16.msra.mxu0 %v4361
  %5650 = vmatprep.subr.bf16.mxu0 0
  %5651 = vmatpush1.bf16.msra.mxu0 %v4362
  %5652 = vmatprep.subr.bf16.mxu0 0
  %5653 = vmatpush1.bf16.msra.mxu0 %v4363
  %5654 = vmatprep.subr.bf16.mxu0 0
  %5655 = vmatpush1.bf16.msra.mxu0 %v4364
  %5656 = vmatprep.subr.bf16.mxu0 0
  %5657 = vmatpush1.bf16.msra.mxu0 %v4365
  %5658 = vmatprep.subr.bf16.mxu0 0
  %5659 = vmatpush1.bf16.msra.mxu0 %v4366
  %5660 = vmatprep.subr.bf16.mxu0 0
  %5661 = vmatpush1.bf16.msra.mxu0 %v4367
  %5662 = vmatprep.subr.bf16.mxu0 0
  %5663 = vmatpush1.bf16.msra.mxu0 %v4368
  %5664 = vmatprep.subr.bf16.mxu0 0
  %5665 = vmatpush1.bf16.msra.mxu0 %v4369
  %5666 = vmatprep.mubr.bf16.mxu0 %v1635
  %5667 = vmatmul.mubr.bf16.gmra.mrb[0].mxu0 %v1634
  %v5668 = vpop.f32.mrb[0].mxu0
  %v5669 = vadd.f32 %v1392, %v5668
  %v5670 = vpop.f32.mrb[0].mxu0
  %v5671 = vpop.f32.mrb[0].mxu0
  %v5672 = vadd.f32 %v1392, %v5671
  %v5673 = vpop.f32.mrb[0].mxu0
  %5674 = vdwg.mxu0
  %5675 = vmatprep.subr.bf16.mxu0 0
  %5676 = vmatpush1.bf16.msra.mxu0 %v4370
  %5677 = vmatprep.subr.bf16.mxu0 0
  %5678 = vmatpush1.bf16.msra.mxu0 %v4371
  %5679 = vmatprep.subr.bf16.mxu0 0
  %5680 = vmatpush1.bf16.msra.mxu0 %v4372
  %5681 = vmatprep.subr.bf16.mxu0 0
  %5682 = vmatpush1.bf16.msra.mxu0 %v4373
  %5683 = vmatprep.subr.bf16.mxu0 0
  %5684 = vmatpush1.bf16.msra.mxu0 %v4374
  %5685 = vmatprep.subr.bf16.mxu0 0
  %5686 = vmatpush1.bf16.msra.mxu0 %v4375
  %5687 = vmatprep.subr.bf16.mxu0 0
  %5688 = vmatpush1.bf16.msra.mxu0 %v4376
  %5689 = vmatprep.subr.bf16.mxu0 0
  %5690 = vmatpush1.bf16.msra.mxu0 %v4377
  %5691 = vmatprep.subr.bf16.mxu0 0
  %5692 = vmatpush1.bf16.msra.mxu0 %v4378
  %5693 = vmatprep.subr.bf16.mxu0 0
  %5694 = vmatpush1.bf16.msra.mxu0 %v4379
  %5695 = vmatprep.subr.bf16.mxu0 0
  %5696 = vmatpush1.bf16.msra.mxu0 %v4380
  %5697 = vmatprep.subr.bf16.mxu0 0
  %5698 = vmatpush1.bf16.msra.mxu0 %v4381
  %5699 = vmatprep.subr.bf16.mxu0 0
  %5700 = vmatpush1.bf16.msra.mxu0 %v4382
  %5701 = vmatprep.subr.bf16.mxu0 0
  %5702 = vmatpush1.bf16.msra.mxu0 %v4383
  %5703 = vmatprep.subr.bf16.mxu0 0
  %5704 = vmatpush1.bf16.msra.mxu0 %v4384
  %5705 = vmatprep.subr.bf16.mxu0 0
  %5706 = vmatpush1.bf16.msra.mxu0 %v4385
  %5707 = vmatprep.mubr.bf16.mxu0 %v1637
  %5708 = vmatmul.mubr.bf16.gmra.mrb[0].mxu0 %v1636
  %v5709 = vpop.f32.mrb[0].mxu0
  %v5710 = vadd.f32 %v5669, %v5709
  %v5711 = vpop.f32.mrb[0].mxu0
  %v5712 = vpop.f32.mrb[0].mxu0
  %v5713 = vadd.f32 %v5672, %v5712
  %v5714 = vpop.f32.mrb[0].mxu0
  %5715 = vdwg.mxu0
  %5716 = vmatprep.subr.bf16.mxu0 0
  %5717 = vmatpush1.bf16.msra.mxu0 %v4386
  %5718 = vmatprep.subr.bf16.mxu0 0
  %5719 = vmatpush1.bf16.msra.mxu0 %v4387
  %5720 = vmatprep.subr.bf16.mxu0 0
  %5721 = vmatpush1.bf16.msra.mxu0 %v4388
  %5722 = vmatprep.subr.bf16.mxu0 0
  %5723 = vmatpush1.bf16.msra.mxu0 %v4389
  %5724 = vmatprep.subr.bf16.mxu0 0
  %5725 = vmatpush1.bf16.msra.mxu0 %v4390
  %5726 = vmatprep.subr.bf16.mxu0 0
  %5727 = vmatpush1.bf16.msra.mxu0 %v4391
  %5728 = vmatprep.subr.bf16.mxu0 0
  %5729 = vmatpush1.bf16.msra.mxu0 %v4392
  %5730 = vmatprep.subr.bf16.mxu0 0
  %5731 = vmatpush1.bf16.msra.mxu0 %v4393
  %5732 = vmatprep.subr.bf16.mxu0 0
  %5733 = vmatpush1.bf16.msra.mxu0 %v4394
  %5734 = vmatprep.subr.bf16.mxu0 0
  %5735 = vmatpush1.bf16.msra.mxu0 %v4395
  %5736 = vmatprep.subr.bf16.mxu0 0
  %5737 = vmatpush1.bf16.msra.mxu0 %v4396
  %5738 = vmatprep.subr.bf16.mxu0 0
  %5739 = vmatpush1.bf16.msra.mxu0 %v4397
  %5740 = vmatprep.subr.bf16.mxu0 0
  %5741 = vmatpush1.bf16.msra.mxu0 %v4398
  %5742 = vmatprep.subr.bf16.mxu0 0
  %5743 = vmatpush1.bf16.msra.mxu0 %v4399
  %5744 = vmatprep.subr.bf16.mxu0 0
  %5745 = vmatpush1.bf16.msra.mxu0 %v4400
  %5746 = vmatprep.subr.bf16.mxu0 0
  %5747 = vmatpush1.bf16.msra.mxu0 %v4401
  %5748 = vmatprep.mubr.bf16.mxu0 %v1639
  %5749 = vmatmul.mubr.bf16.gmra.mrb[0].mxu0 %v1638
  %v5750 = vpop.f32.mrb[0].mxu0
  %v5751 = vadd.f32 %v5710, %v5750
  %v5752 = vpop.f32.mrb[0].mxu0
  %v5753 = vpop.f32.mrb[0].mxu0
  %v5754 = vadd.f32 %v5713, %v5753
  %v5755 = vpop.f32.mrb[0].mxu0
  %5756 = vdwg.mxu0
  %5757 = vmatprep.subr.bf16.mxu0 0
  %5758 = vmatpush1.bf16.msra.mxu0 %v4402
  %5759 = vmatprep.subr.bf16.mxu0 0
  %5760 = vmatpush1.bf16.msra.mxu0 %v4403
  %5761 = vmatprep.subr.bf16.mxu0 0
  %5762 = vmatpush1.bf16.msra.mxu0 %v4404
  %5763 = vmatprep.subr.bf16.mxu0 0
  %5764 = vmatpush1.bf16.msra.mxu0 %v4405
  %5765 = vmatprep.subr.bf16.mxu0 0
  %5766 = vmatpush1.bf16.msra.mxu0 %v4406
  %5767 = vmatprep.subr.bf16.mxu0 0
  %5768 = vmatpush1.bf16.msra.mxu0 %v4407
  %5769 = vmatprep.subr.bf16.mxu0 0
  %5770 = vmatpush1.bf16.msra.mxu0 %v4408
  %5771 = vmatprep.subr.bf16.mxu0 0
  %5772 = vmatpush1.bf16.msra.mxu0 %v4409
  %5773 = vmatprep.subr.bf16.mxu0 0
  %5774 = vmatpush1.bf16.msra.mxu0 %v4410
  %5775 = vmatprep.subr.bf16.mxu0 0
  %5776 = vmatpush1.bf16.msra.mxu0 %v4411
  %5777 = vmatprep.subr.bf16.mxu0 0
  %5778 = vmatpush1.bf16.msra.mxu0 %v4412
  %5779 = vmatprep.subr.bf16.mxu0 0
  %5780 = vmatpush1.bf16.msra.mxu0 %v4413
  %5781 = vmatprep.subr.bf16.mxu0 0
  %5782 = vmatpush1.bf16.msra.mxu0 %v4414
  %5783 = vmatprep.subr.bf16.mxu0 0
  %5784 = vmatpush1.bf16.msra.mxu0 %v4415
  %5785 = vmatprep.subr.bf16.mxu0 0
  %5786 = vmatpush1.bf16.msra.mxu0 %v4416
  %5787 = vmatprep.subr.bf16.mxu0 0
  %5788 = vmatpush1.bf16.msra.mxu0 %v4417
  %5789 = vmatprep.mubr.bf16.mxu0 %v1641
  %5790 = vmatmul.mubr.bf16.gmra.mrb[0].mxu0 %v1640
  %v5791 = vpop.f32.mrb[0].mxu0
  %v5792 = vadd.f32 %v5751, %v5791
  %v5793 = vpop.f32.mrb[0].mxu0
  %v5794 = vpop.f32.mrb[0].mxu0
  %v5795 = vadd.f32 %v5754, %v5794
  %v5796 = vpop.f32.mrb[0].mxu0
  %5797 = vdwg.mxu0
  %5798 = vmatprep.subr.bf16.mxu0 0
  %5799 = vmatpush1.bf16.msra.mxu0 %v4418
  %5800 = vmatprep.subr.bf16.mxu0 0
  %5801 = vmatpush1.bf16.msra.mxu0 %v4419
  %5802 = vmatprep.subr.bf16.mxu0 0
  %5803 = vmatpush1.bf16.msra.mxu0 %v4420
  %5804 = vmatprep.subr.bf16.mxu0 0
  %5805 = vmatpush1.bf16.msra.mxu0 %v4421
  %5806 = vmatprep.subr.bf16.mxu0 0
  %5807 = vmatpush1.bf16.msra.mxu0 %v4422
  %5808 = vmatprep.subr.bf16.mxu0 0
  %5809 = vmatpush1.bf16.msra.mxu0 %v4423
  %5810 = vmatprep.subr.bf16.mxu0 0
  %5811 = vmatpush1.bf16.msra.mxu0 %v4424
  %5812 = vmatprep.subr.bf16.mxu0 0
  %5813 = vmatpush1.bf16.msra.mxu0 %v4425
  %5814 = vmatprep.subr.bf16.mxu0 0
  %5815 = vmatpush1.bf16.msra.mxu0 %v4426
  %5816 = vmatprep.subr.bf16.mxu0 0
  %5817 = vmatpush1.bf16.msra.mxu0 %v4427
  %5818 = vmatprep.subr.bf16.mxu0 0
  %5819 = vmatpush1.bf16.msra.mxu0 %v4428
  %5820 = vmatprep.subr.bf16.mxu0 0
  %5821 = vmatpush1.bf16.msra.mxu0 %v4429
  %5822 = vmatprep.subr.bf16.mxu0 0
  %5823 = vmatpush1.bf16.msra.mxu0 %v4430
  %5824 = vmatprep.subr.bf16.mxu0 0
  %5825 = vmatpush1.bf16.msra.mxu0 %v4431
  %5826 = vmatprep.subr.bf16.mxu0 0
  %5827 = vmatpush1.bf16.msra.mxu0 %v4432
  %5828 = vmatprep.subr.bf16.mxu0 0
  %5829 = vmatpush1.bf16.msra.mxu0 %v4433
  %5830 = vmatprep.mubr.bf16.mxu0 %v1643
  %5831 = vmatmul.mubr.bf16.gmra.mrb[0].mxu0 %v1642
  %v5832 = vpop.f32.mrb[0].mxu0
  %v5833 = vadd.f32 %v5792, %v5832
  %v5834 = vpop.f32.mrb[0].mxu0
  %v5835 = vpop.f32.mrb[0].mxu0
  %v5836 = vadd.f32 %v5795, %v5835
  %v5837 = vpop.f32.mrb[0].mxu0
  %5838 = vdwg.mxu0
  %5839 = vmatprep.subr.bf16.mxu0 0
  %5840 = vmatpush1.bf16.msra.mxu0 %v4434
  %5841 = vmatprep.subr.bf16.mxu0 0
  %5842 = vmatpush1.bf16.msra.mxu0 %v4435
  %5843 = vmatprep.subr.bf16.mxu0 0
  %5844 = vmatpush1.bf16.msra.mxu0 %v4436
  %5845 = vmatprep.subr.bf16.mxu0 0
  %5846 = vmatpush1.bf16.msra.mxu0 %v4437
  %5847 = vmatprep.subr.bf16.mxu0 0
  %5848 = vmatpush1.bf16.msra.mxu0 %v4438
  %5849 = vmatprep.subr.bf16.mxu0 0
  %5850 = vmatpush1.bf16.msra.mxu0 %v4439
  %5851 = vmatprep.subr.bf16.mxu0 0
  %5852 = vmatpush1.bf16.msra.mxu0 %v4440
  %5853 = vmatprep.subr.bf16.mxu0 0
  %5854 = vmatpush1.bf16.msra.mxu0 %v4441
  %5855 = vmatprep.subr.bf16.mxu0 0
  %5856 = vmatpush1.bf16.msra.mxu0 %v4442
  %5857 = vmatprep.subr.bf16.mxu0 0
  %5858 = vmatpush1.bf16.msra.mxu0 %v4443
  %5859 = vmatprep.subr.bf16.mxu0 0
  %5860 = vmatpush1.bf16.msra.mxu0 %v4444
  %5861 = vmatprep.subr.bf16.mxu0 0
  %5862 = vmatpush1.bf16.msra.mxu0 %v4445
  %5863 = vmatprep.subr.bf16.mxu0 0
  %5864 = vmatpush1.bf16.msra.mxu0 %v4446
  %5865 = vmatprep.subr.bf16.mxu0 0
  %5866 = vmatpush1.bf16.msra.mxu0 %v4447
  %5867 = vmatprep.subr.bf16.mxu0 0
  %5868 = vmatpush1.bf16.msra.mxu0 %v4448
  %5869 = vmatprep.subr.bf16.mxu0 0
  %5870 = vmatpush1.bf16.msra.mxu0 %v4449
  %5871 = vmatprep.mubr.bf16.mxu0 %v1645
  %5872 = vmatmul.mubr.bf16.gmra.mrb[0].mxu0 %v1644
  %v5873 = vpop.f32.mrb[0].mxu0
  %v5874 = vadd.f32 %v5833, %v5873
  %v5875 = vpop.f32.mrb[0].mxu0
  %v5876 = vpop.f32.mrb[0].mxu0
  %v5877 = vadd.f32 %v5836, %v5876
  %v5878 = vpop.f32.mrb[0].mxu0
  %5879 = vdwg.mxu0
  %5880 = vmatprep.subr.bf16.mxu0 0
  %5881 = vmatpush1.bf16.msra.mxu0 %v4450
  %5882 = vmatprep.subr.bf16.mxu0 0
  %5883 = vmatpush1.bf16.msra.mxu0 %v4451
  %5884 = vmatprep.subr.bf16.mxu0 0
  %5885 = vmatpush1.bf16.msra.mxu0 %v4452
  %5886 = vmatprep.subr.bf16.mxu0 0
  %5887 = vmatpush1.bf16.msra.mxu0 %v4453
  %5888 = vmatprep.subr.bf16.mxu0 0
  %5889 = vmatpush1.bf16.msra.mxu0 %v4454
  %5890 = vmatprep.subr.bf16.mxu0 0
  %5891 = vmatpush1.bf16.msra.mxu0 %v4455
  %5892 = vmatprep.subr.bf16.mxu0 0
  %5893 = vmatpush1.bf16.msra.mxu0 %v4456
  %5894 = vmatprep.subr.bf16.mxu0 0
  %5895 = vmatpush1.bf16.msra.mxu0 %v4457
  %5896 = vmatprep.subr.bf16.mxu0 0
  %5897 = vmatpush1.bf16.msra.mxu0 %v4458
  %5898 = vmatprep.subr.bf16.mxu0 0
  %5899 = vmatpush1.bf16.msra.mxu0 %v4459
  %5900 = vmatprep.subr.bf16.mxu0 0
  %5901 = vmatpush1.bf16.msra.mxu0 %v4460
  %5902 = vmatprep.subr.bf16.mxu0 0
  %5903 = vmatpush1.bf16.msra.mxu0 %v4461
  %5904 = vmatprep.subr.bf16.mxu0 0
  %5905 = vmatpush1.bf16.msra.mxu0 %v4462
  %5906 = vmatprep.subr.bf16.mxu0 0
  %5907 = vmatpush1.bf16.msra.mxu0 %v4463
  %5908 = vmatprep.subr.bf16.mxu0 0
  %5909 = vmatpush1.bf16.msra.mxu0 %v4464
  %5910 = vmatprep.subr.bf16.mxu0 0
  %5911 = vmatpush1.bf16.msra.mxu0 %v4465
  %5912 = vmatprep.mubr.bf16.mxu0 %v1647
  %5913 = vmatmul.mubr.bf16.gmra.mrb[0].mxu0 %v1646
  %v5914 = vpop.f32.mrb[0].mxu0
  %v5915 = vadd.f32 %v5874, %v5914
  %v5916 = vpop.f32.mrb[0].mxu0
  %v5917 = vpop.f32.mrb[0].mxu0
  %v5918 = vadd.f32 %v5877, %v5917
  %v5919 = vpop.f32.mrb[0].mxu0
  %5920 = vdwg.mxu0
  %5921 = vmatprep.subr.bf16.mxu0 0
  %5922 = vmatpush1.bf16.msra.mxu0 %v4466
  %5923 = vmatprep.subr.bf16.mxu0 0
  %5924 = vmatpush1.bf16.msra.mxu0 %v4467
  %5925 = vmatprep.subr.bf16.mxu0 0
  %5926 = vmatpush1.bf16.msra.mxu0 %v4468
  %5927 = vmatprep.subr.bf16.mxu0 0
  %5928 = vmatpush1.bf16.msra.mxu0 %v4469
  %5929 = vmatprep.subr.bf16.mxu0 0
  %5930 = vmatpush1.bf16.msra.mxu0 %v4470
  %5931 = vmatprep.subr.bf16.mxu0 0
  %5932 = vmatpush1.bf16.msra.mxu0 %v4471
  %5933 = vmatprep.subr.bf16.mxu0 0
  %5934 = vmatpush1.bf16.msra.mxu0 %v4472
  %5935 = vmatprep.subr.bf16.mxu0 0
  %5936 = vmatpush1.bf16.msra.mxu0 %v4473
  %5937 = vmatprep.subr.bf16.mxu0 0
  %5938 = vmatpush1.bf16.msra.mxu0 %v4474
  %5939 = vmatprep.subr.bf16.mxu0 0
  %5940 = vmatpush1.bf16.msra.mxu0 %v4475
  %5941 = vmatprep.subr.bf16.mxu0 0
  %5942 = vmatpush1.bf16.msra.mxu0 %v4476
  %5943 = vmatprep.subr.bf16.mxu0 0
  %5944 = vmatpush1.bf16.msra.mxu0 %v4477
  %5945 = vmatprep.subr.bf16.mxu0 0
  %5946 = vmatpush1.bf16.msra.mxu0 %v4478
  %5947 = vmatprep.subr.bf16.mxu0 0
  %5948 = vmatpush1.bf16.msra.mxu0 %v4479
  %5949 = vmatprep.subr.bf16.mxu0 0
  %5950 = vmatpush1.bf16.msra.mxu0 %v4480
  %5951 = vmatprep.subr.bf16.mxu0 0
  %5952 = vmatpush1.bf16.msra.mxu0 %v4481
  %5953 = vmatprep.mubr.bf16.mxu0 %v1649
  %5954 = vmatmul.mubr.bf16.gmra.mrb[0].mxu0 %v1648
  %v5955 = vpop.f32.mrb[0].mxu0
  %v5956 = vadd.f32 %v5915, %v5955
  %v5957 = vpop.f32.mrb[0].mxu0
  %v5958 = vpop.f32.mrb[0].mxu0
  %v5959 = vadd.f32 %v5918, %v5958
  %v5960 = vpop.f32.mrb[0].mxu0
  %5961 = vdwg.mxu0
  %5962 = vmatprep.subr.bf16.mxu0 0
  %5963 = vmatpush1.bf16.msra.mxu0 %v4482
  %5964 = vmatprep.subr.bf16.mxu0 0
  %5965 = vmatpush1.bf16.msra.mxu0 %v4483
  %5966 = vmatprep.subr.bf16.mxu0 0
  %5967 = vmatpush1.bf16.msra.mxu0 %v4484
  %5968 = vmatprep.subr.bf16.mxu0 0
  %5969 = vmatpush1.bf16.msra.mxu0 %v4485
  %5970 = vmatprep.subr.bf16.mxu0 0
  %5971 = vmatpush1.bf16.msra.mxu0 %v4486
  %5972 = vmatprep.subr.bf16.mxu0 0
  %5973 = vmatpush1.bf16.msra.mxu0 %v4487
  %5974 = vmatprep.subr.bf16.mxu0 0
  %5975 = vmatpush1.bf16.msra.mxu0 %v4488
  %5976 = vmatprep.subr.bf16.mxu0 0
  %5977 = vmatpush1.bf16.msra.mxu0 %v4489
  %5978 = vmatprep.subr.bf16.mxu0 0
  %5979 = vmatpush1.bf16.msra.mxu0 %v4490
  %5980 = vmatprep.subr.bf16.mxu0 0
  %5981 = vmatpush1.bf16.msra.mxu0 %v4491
  %5982 = vmatprep.subr.bf16.mxu0 0
  %5983 = vmatpush1.bf16.msra.mxu0 %v4492
  %5984 = vmatprep.subr.bf16.mxu0 0
  %5985 = vmatpush1.bf16.msra.mxu0 %v4493
  %5986 = vmatprep.subr.bf16.mxu0 0
  %5987 = vmatpush1.bf16.msra.mxu0 %v4494
  %5988 = vmatprep.subr.bf16.mxu0 0
  %5989 = vmatpush1.bf16.msra.mxu0 %v4495
  %5990 = vmatprep.subr.bf16.mxu0 0
  %5991 = vmatpush1.bf16.msra.mxu0 %v4496
  %5992 = vmatprep.subr.bf16.mxu0 0
  %5993 = vmatpush1.bf16.msra.mxu0 %v4497
  %5994 = vmatprep.mubr.bf16.mxu0 %v1651
  %5995 = vmatmul.mubr.bf16.gmra.mrb[0].mxu0 %v1650
  %v5996 = vpop.f32.mrb[0].mxu0
  %v5997 = vadd.f32 %v5956, %v5996
  %v5998 = vpop.f32.mrb[0].mxu0
  %v5999 = vpop.f32.mrb[0].mxu0
  %v6000 = vadd.f32 %v5959, %v5999
  %v6001 = vpop.f32.mrb[0].mxu0
  %6002 = vdwg.mxu0
  %6003 = vmatprep.subr.bf16.mxu0 0
  %6004 = vmatpush1.bf16.msra.mxu0 %v4498
  %6005 = vmatprep.subr.bf16.mxu0 0
  %6006 = vmatpush1.bf16.msra.mxu0 %v4499
  %6007 = vmatprep.subr.bf16.mxu0 0
  %6008 = vmatpush1.bf16.msra.mxu0 %v4500
  %6009 = vmatprep.subr.bf16.mxu0 0
  %6010 = vmatpush1.bf16.msra.mxu0 %v4501
  %6011 = vmatprep.subr.bf16.mxu0 0
  %6012 = vmatpush1.bf16.msra.mxu0 %v4502
  %6013 = vmatprep.subr.bf16.mxu0 0
  %6014 = vmatpush1.bf16.msra.mxu0 %v4503
  %6015 = vmatprep.subr.bf16.mxu0 0
  %6016 = vmatpush1.bf16.msra.mxu0 %v4504
  %6017 = vmatprep.subr.bf16.mxu0 0
  %6018 = vmatpush1.bf16.msra.mxu0 %v4505
  %6019 = vmatprep.subr.bf16.mxu0 0
  %6020 = vmatpush1.bf16.msra.mxu0 %v4506
  %6021 = vmatprep.subr.bf16.mxu0 0
  %6022 = vmatpush1.bf16.msra.mxu0 %v4507
  %6023 = vmatprep.subr.bf16.mxu0 0
  %6024 = vmatpush1.bf16.msra.mxu0 %v4508
  %6025 = vmatprep.subr.bf16.mxu0 0
  %6026 = vmatpush1.bf16.msra.mxu0 %v4509
  %6027 = vmatprep.subr.bf16.mxu0 0
  %6028 = vmatpush1.bf16.msra.mxu0 %v4510
  %6029 = vmatprep.subr.bf16.mxu0 0
  %6030 = vmatpush1.bf16.msra.mxu0 %v4511
  %6031 = vmatprep.subr.bf16.mxu0 0
  %6032 = vmatpush1.bf16.msra.mxu0 %v4512
  %6033 = vmatprep.subr.bf16.mxu0 0
  %6034 = vmatpush1.bf16.msra.mxu0 %v4513
  %6035 = vmatprep.mubr.bf16.mxu0 %v1653
  %6036 = vmatmul.mubr.bf16.gmra.mrb[0].mxu0 %v1652
  %v6037 = vpop.f32.mrb[0].mxu0
  %v6038 = vadd.f32 %v5997, %v6037
  %v6039 = vpop.f32.mrb[0].mxu0
  %v6040 = vpop.f32.mrb[0].mxu0
  %v6041 = vadd.f32 %v6000, %v6040
  %v6042 = vpop.f32.mrb[0].mxu0
  %6043 = vdwg.mxu0
  %6044 = vmatprep.subr.bf16.mxu0 0
  %6045 = vmatpush1.bf16.msra.mxu0 %v4514
  %6046 = vmatprep.subr.bf16.mxu0 0
  %6047 = vmatpush1.bf16.msra.mxu0 %v4515
  %6048 = vmatprep.subr.bf16.mxu0 0
  %6049 = vmatpush1.bf16.msra.mxu0 %v4516
  %6050 = vmatprep.subr.bf16.mxu0 0
  %6051 = vmatpush1.bf16.msra.mxu0 %v4517
  %6052 = vmatprep.subr.bf16.mxu0 0
  %6053 = vmatpush1.bf16.msra.mxu0 %v4518
  %6054 = vmatprep.subr.bf16.mxu0 0
  %6055 = vmatpush1.bf16.msra.mxu0 %v4519
  %6056 = vmatprep.subr.bf16.mxu0 0
  %6057 = vmatpush1.bf16.msra.mxu0 %v4520
  %6058 = vmatprep.subr.bf16.mxu0 0
  %6059 = vmatpush1.bf16.msra.mxu0 %v4521
  %6060 = vmatprep.subr.bf16.mxu0 0
  %6061 = vmatpush1.bf16.msra.mxu0 %v4522
  %6062 = vmatprep.subr.bf16.mxu0 0
  %6063 = vmatpush1.bf16.msra.mxu0 %v4523
  %6064 = vmatprep.subr.bf16.mxu0 0
  %6065 = vmatpush1.bf16.msra.mxu0 %v4524
  %6066 = vmatprep.subr.bf16.mxu0 0
  %6067 = vmatpush1.bf16.msra.mxu0 %v4525
  %6068 = vmatprep.subr.bf16.mxu0 0
  %6069 = vmatpush1.bf16.msra.mxu0 %v4526
  %6070 = vmatprep.subr.bf16.mxu0 0
  %6071 = vmatpush1.bf16.msra.mxu0 %v4527
  %6072 = vmatprep.subr.bf16.mxu0 0
  %6073 = vmatpush1.bf16.msra.mxu0 %v4528
  %6074 = vmatprep.subr.bf16.mxu0 0
  %6075 = vmatpush1.bf16.msra.mxu0 %v4529
  %6076 = vmatprep.mubr.bf16.mxu0 %v1655
  %6077 = vmatmul.mubr.bf16.gmra.mrb[0].mxu0 %v1654
  %v6078 = vpop.f32.mrb[0].mxu0
  %v6079 = vadd.f32 %v6038, %v6078
  %v6080 = vpop.f32.mrb[0].mxu0
  %v6081 = vpop.f32.mrb[0].mxu0
  %v6082 = vadd.f32 %v6041, %v6081
  %v6083 = vpop.f32.mrb[0].mxu0
  %6084 = vdwg.mxu0
  %6085 = vmatprep.subr.bf16.mxu0 0
  %6086 = vmatpush1.bf16.msra.mxu0 %v4530
  %6087 = vmatprep.subr.bf16.mxu0 0
  %6088 = vmatpush1.bf16.msra.mxu0 %v4531
  %6089 = vmatprep.subr.bf16.mxu0 0
  %6090 = vmatpush1.bf16.msra.mxu0 %v4532
  %6091 = vmatprep.subr.bf16.mxu0 0
  %6092 = vmatpush1.bf16.msra.mxu0 %v4533
  %6093 = vmatprep.subr.bf16.mxu0 0
  %6094 = vmatpush1.bf16.msra.mxu0 %v4534
  %6095 = vmatprep.subr.bf16.mxu0 0
  %6096 = vmatpush1.bf16.msra.mxu0 %v4535
  %6097 = vmatprep.subr.bf16.mxu0 0
  %6098 = vmatpush1.bf16.msra.mxu0 %v4536
  %6099 = vmatprep.subr.bf16.mxu0 0
  %6100 = vmatpush1.bf16.msra.mxu0 %v4537
  %6101 = vmatprep.subr.bf16.mxu0 0
  %6102 = vmatpush1.bf16.msra.mxu0 %v4538
  %6103 = vmatprep.subr.bf16.mxu0 0
  %6104 = vmatpush1.bf16.msra.mxu0 %v4539
  %6105 = vmatprep.subr.bf16.mxu0 0
  %6106 = vmatpush1.bf16.msra.mxu0 %v4540
  %6107 = vmatprep.subr.bf16.mxu0 0
  %6108 = vmatpush1.bf16.msra.mxu0 %v4541
  %6109 = vmatprep.subr.bf16.mxu0 0
  %6110 = vmatpush1.bf16.msra.mxu0 %v4542
  %6111 = vmatprep.subr.bf16.mxu0 0
  %6112 = vmatpush1.bf16.msra.mxu0 %v4543
  %6113 = vmatprep.subr.bf16.mxu0 0
  %6114 = vmatpush1.bf16.msra.mxu0 %v4544
  %6115 = vmatprep.subr.bf16.mxu0 0
  %6116 = vmatpush1.bf16.msra.mxu0 %v4545
  %6117 = vmatprep.mubr.bf16.mxu0 %v1657
  %6118 = vmatmul.mubr.bf16.gmra.mrb[0].mxu0 %v1656
  %v6119 = vpop.f32.mrb[0].mxu0
  %v6120 = vadd.f32 %v6079, %v6119
  %v6121 = vpop.f32.mrb[0].mxu0
  %v6122 = vpop.f32.mrb[0].mxu0
  %v6123 = vadd.f32 %v6082, %v6122
  %v6124 = vpop.f32.mrb[0].mxu0
  %6125 = vdwg.mxu0
  %6126 = vmatprep.subr.bf16.mxu0 0
  %6127 = vmatpush1.bf16.msra.mxu0 %v4546
  %6128 = vmatprep.subr.bf16.mxu0 0
  %6129 = vmatpush1.bf16.msra.mxu0 %v4547
  %6130 = vmatprep.subr.bf16.mxu0 0
  %6131 = vmatpush1.bf16.msra.mxu0 %v4548
  %6132 = vmatprep.subr.bf16.mxu0 0
  %6133 = vmatpush1.bf16.msra.mxu0 %v4549
  %6134 = vmatprep.subr.bf16.mxu0 0
  %6135 = vmatpush1.bf16.msra.mxu0 %v4550
  %6136 = vmatprep.subr.bf16.mxu0 0
  %6137 = vmatpush1.bf16.msra.mxu0 %v4551
  %6138 = vmatprep.subr.bf16.mxu0 0
  %6139 = vmatpush1.bf16.msra.mxu0 %v4552
  %6140 = vmatprep.subr.bf16.mxu0 0
  %6141 = vmatpush1.bf16.msra.mxu0 %v4553
  %6142 = vmatprep.subr.bf16.mxu0 0
  %6143 = vmatpush1.bf16.msra.mxu0 %v4554
  %6144 = vmatprep.subr.bf16.mxu0 0
  %6145 = vmatpush1.bf16.msra.mxu0 %v4555
  %6146 = vmatprep.subr.bf16.mxu0 0
  %6147 = vmatpush1.bf16.msra.mxu0 %v4556
  %6148 = vmatprep.subr.bf16.mxu0 0
  %6149 = vmatpush1.bf16.msra.mxu0 %v4557
  %6150 = vmatprep.subr.bf16.mxu0 0
  %6151 = vmatpush1.bf16.msra.mxu0 %v4558
  %6152 = vmatprep.subr.bf16.mxu0 0
  %6153 = vmatpush1.bf16.msra.mxu0 %v4559
  %6154 = vmatprep.subr.bf16.mxu0 0
  %6155 = vmatpush1.bf16.msra.mxu0 %v4560
  %6156 = vmatprep.subr.bf16.mxu0 0
  %6157 = vmatpush1.bf16.msra.mxu0 %v4561
  %6158 = vmatprep.mubr.bf16.mxu0 %v1659
  %6159 = vmatmul.mubr.bf16.gmra.mrb[0].mxu0 %v1658
  %v6160 = vpop.f32.mrb[0].mxu0
  %v6161 = vadd.f32 %v6120, %v6160
  %v6162 = vpop.f32.mrb[0].mxu0
  %v6163 = vpop.f32.mrb[0].mxu0
  %v6164 = vadd.f32 %v6123, %v6163
  %v6165 = vpop.f32.mrb[0].mxu0
  %6166 = vdwg.mxu0
  %6167 = vmatprep.subr.bf16.mxu0 0
  %6168 = vmatpush1.bf16.msra.mxu0 %v4562
  %6169 = vmatprep.subr.bf16.mxu0 0
  %6170 = vmatpush1.bf16.msra.mxu0 %v4563
  %6171 = vmatprep.subr.bf16.mxu0 0
  %6172 = vmatpush1.bf16.msra.mxu0 %v4564
  %6173 = vmatprep.subr.bf16.mxu0 0
  %6174 = vmatpush1.bf16.msra.mxu0 %v4565
  %6175 = vmatprep.subr.bf16.mxu0 0
  %6176 = vmatpush1.bf16.msra.mxu0 %v4566
  %6177 = vmatprep.subr.bf16.mxu0 0
  %6178 = vmatpush1.bf16.msra.mxu0 %v4567
  %6179 = vmatprep.subr.bf16.mxu0 0
  %6180 = vmatpush1.bf16.msra.mxu0 %v4568
  %6181 = vmatprep.subr.bf16.mxu0 0
  %6182 = vmatpush1.bf16.msra.mxu0 %v4569
  %6183 = vmatprep.subr.bf16.mxu0 0
  %6184 = vmatpush1.bf16.msra.mxu0 %v4570
  %6185 = vmatprep.subr.bf16.mxu0 0
  %6186 = vmatpush1.bf16.msra.mxu0 %v4571
  %6187 = vmatprep.subr.bf16.mxu0 0
  %6188 = vmatpush1.bf16.msra.mxu0 %v4572
  %6189 = vmatprep.subr.bf16.mxu0 0
  %6190 = vmatpush1.bf16.msra.mxu0 %v4573
  %6191 = vmatprep.subr.bf16.mxu0 0
  %6192 = vmatpush1.bf16.msra.mxu0 %v4574
  %6193 = vmatprep.subr.bf16.mxu0 0
  %6194 = vmatpush1.bf16.msra.mxu0 %v4575
  %6195 = vmatprep.subr.bf16.mxu0 0
  %6196 = vmatpush1.bf16.msra.mxu0 %v4576
  %6197 = vmatprep.subr.bf16.mxu0 0
  %6198 = vmatpush1.bf16.msra.mxu0 %v4577
  %6199 = vmatprep.mubr.bf16.mxu0 %v1661
  %6200 = vmatmul.mubr.bf16.gmra.mrb[0].mxu0 %v1660
  %v6201 = vpop.f32.mrb[0].mxu0
  %v6202 = vadd.f32 %v6161, %v6201
  %v6203 = vpop.f32.mrb[0].mxu0
  %v6204 = vpop.f32.mrb[0].mxu0
  %v6205 = vadd.f32 %v6164, %v6204
  %v6206 = vpop.f32.mrb[0].mxu0
  %6207 = vdwg.mxu0
  %6208 = vmatprep.subr.bf16.mxu0 0
  %6209 = vmatpush1.bf16.msra.mxu0 %v4578
  %6210 = vmatprep.subr.bf16.mxu0 0
  %6211 = vmatpush1.bf16.msra.mxu0 %v4579
  %6212 = vmatprep.subr.bf16.mxu0 0
  %6213 = vmatpush1.bf16.msra.mxu0 %v4580
  %6214 = vmatprep.subr.bf16.mxu0 0
  %6215 = vmatpush1.bf16.msra.mxu0 %v4581
  %6216 = vmatprep.subr.bf16.mxu0 0
  %6217 = vmatpush1.bf16.msra.mxu0 %v4582
  %6218 = vmatprep.subr.bf16.mxu0 0
  %6219 = vmatpush1.bf16.msra.mxu0 %v4583
  %6220 = vmatprep.subr.bf16.mxu0 0
  %6221 = vmatpush1.bf16.msra.mxu0 %v4584
  %6222 = vmatprep.subr.bf16.mxu0 0
  %6223 = vmatpush1.bf16.msra.mxu0 %v4585
  %6224 = vmatprep.subr.bf16.mxu0 0
  %6225 = vmatpush1.bf16.msra.mxu0 %v4586
  %6226 = vmatprep.subr.bf16.mxu0 0
  %6227 = vmatpush1.bf16.msra.mxu0 %v4587
  %6228 = vmatprep.subr.bf16.mxu0 0
  %6229 = vmatpush1.bf16.msra.mxu0 %v4588
  %6230 = vmatprep.subr.bf16.mxu0 0
  %6231 = vmatpush1.bf16.msra.mxu0 %v4589
  %6232 = vmatprep.subr.bf16.mxu0 0
  %6233 = vmatpush1.bf16.msra.mxu0 %v4590
  %6234 = vmatprep.subr.bf16.mxu0 0
  %6235 = vmatpush1.bf16.msra.mxu0 %v4591
  %6236 = vmatprep.subr.bf16.mxu0 0
  %6237 = vmatpush1.bf16.msra.mxu0 %v4592
  %6238 = vmatprep.subr.bf16.mxu0 0
  %6239 = vmatpush1.bf16.msra.mxu0 %v4593
  %6240 = vmatprep.mubr.bf16.mxu0 %v1663
  %6241 = vmatmul.mubr.bf16.gmra.mrb[0].mxu0 %v1662
  %v6242 = vpop.f32.mrb[0].mxu0
  %v6243 = vadd.f32 %v6202, %v6242
  %v6244 = vpop.f32.mrb[0].mxu0
  %v6245 = vpop.f32.mrb[0].mxu0
  %v6246 = vadd.f32 %v6205, %v6245
  %v6247 = vpop.f32.mrb[0].mxu0
  %6248 = vdwg.mxu0
  %6249 = vmatprep.subr.bf16.mxu0 0
  %6250 = vmatpush1.bf16.msra.mxu0 %v4594
  %6251 = vmatprep.subr.bf16.mxu0 0
  %6252 = vmatpush1.bf16.msra.mxu0 %v4595
  %6253 = vmatprep.subr.bf16.mxu0 0
  %6254 = vmatpush1.bf16.msra.mxu0 %v4596
  %6255 = vmatprep.subr.bf16.mxu0 0
  %6256 = vmatpush1.bf16.msra.mxu0 %v4597
  %6257 = vmatprep.subr.bf16.mxu0 0
  %6258 = vmatpush1.bf16.msra.mxu0 %v4598
  %6259 = vmatprep.subr.bf16.mxu0 0
  %6260 = vmatpush1.bf16.msra.mxu0 %v4599
  %6261 = vmatprep.subr.bf16.mxu0 0
  %6262 = vmatpush1.bf16.msra.mxu0 %v4600
  %6263 = vmatprep.subr.bf16.mxu0 0
  %6264 = vmatpush1.bf16.msra.mxu0 %v4601
  %6265 = vmatprep.subr.bf16.mxu0 0
  %6266 = vmatpush1.bf16.msra.mxu0 %v4602
  %6267 = vmatprep.subr.bf16.mxu0 0
  %6268 = vmatpush1.bf16.msra.mxu0 %v4603
  %6269 = vmatprep.subr.bf16.mxu0 0
  %6270 = vmatpush1.bf16.msra.mxu0 %v4604
  %6271 = vmatprep.subr.bf16.mxu0 0
  %6272 = vmatpush1.bf16.msra.mxu0 %v4605
  %6273 = vmatprep.subr.bf16.mxu0 0
  %6274 = vmatpush1.bf16.msra.mxu0 %v4606
  %6275 = vmatprep.subr.bf16.mxu0 0
  %6276 = vmatpush1.bf16.msra.mxu0 %v4607
  %6277 = vmatprep.subr.bf16.mxu0 0
  %6278 = vmatpush1.bf16.msra.mxu0 %v4608
  %6279 = vmatprep.subr.bf16.mxu0 0
  %6280 = vmatpush1.bf16.msra.mxu0 %v4609
  %6281 = vmatprep.mubr.bf16.mxu0 %v1665
  %6282 = vmatmul.mubr.bf16.gmra.mrb[0].mxu0 %v1664
  %v6283 = vpop.f32.mrb[0].mxu0
  %v6284 = vadd.f32 %v6243, %v6283
  %v6285 = vpop.f32.mrb[0].mxu0
  %v6286 = vpop.f32.mrb[0].mxu0
  %v6287 = vadd.f32 %v6246, %v6286
  %v6288 = vpop.f32.mrb[0].mxu0
  %6289 = vdwg.mxu0
  %6290 = vmatprep.subr.bf16.mxu0 0
  %6291 = vmatpush1.bf16.msra.mxu0 %v4610
  %6292 = vmatprep.subr.bf16.mxu0 0
  %6293 = vmatpush1.bf16.msra.mxu0 %v4611
  %6294 = vmatprep.subr.bf16.mxu0 0
  %6295 = vmatpush1.bf16.msra.mxu0 %v4612
  %6296 = vmatprep.subr.bf16.mxu0 0
  %6297 = vmatpush1.bf16.msra.mxu0 %v4613
  %6298 = vmatprep.subr.bf16.mxu0 0
  %6299 = vmatpush1.bf16.msra.mxu0 %v4614
  %6300 = vmatprep.subr.bf16.mxu0 0
  %6301 = vmatpush1.bf16.msra.mxu0 %v4615
  %6302 = vmatprep.subr.bf16.mxu0 0
  %6303 = vmatpush1.bf16.msra.mxu0 %v4616
  %6304 = vmatprep.subr.bf16.mxu0 0
  %6305 = vmatpush1.bf16.msra.mxu0 %v4617
  %6306 = vmatprep.subr.bf16.mxu0 0
  %6307 = vmatpush1.bf16.msra.mxu0 %v4618
  %6308 = vmatprep.subr.bf16.mxu0 0
  %6309 = vmatpush1.bf16.msra.mxu0 %v4619
  %6310 = vmatprep.subr.bf16.mxu0 0
  %6311 = vmatpush1.bf16.msra.mxu0 %v4620
  %6312 = vmatprep.subr.bf16.mxu0 0
  %6313 = vmatpush1.bf16.msra.mxu0 %v4621
  %6314 = vmatprep.subr.bf16.mxu0 0
  %6315 = vmatpush1.bf16.msra.mxu0 %v4622
  %6316 = vmatprep.subr.bf16.mxu0 0
  %6317 = vmatpush1.bf16.msra.mxu0 %v4623
  %6318 = vmatprep.subr.bf16.mxu0 0
  %6319 = vmatpush1.bf16.msra.mxu0 %v4624
  %6320 = vmatprep.subr.bf16.mxu0 0
  %6321 = vmatpush1.bf16.msra.mxu0 %v4625
  %6322 = vmatprep.mubr.bf16.mxu0 %v1667
  %6323 = vmatmul.mubr.bf16.gmra.mrb[0].mxu0 %v1666
  %v6324 = vpop.f32.mrb[0].mxu0
  %v6325 = vadd.f32 %v6284, %v6324
  %v6326 = vpop.f32.mrb[0].mxu0
  %v6327 = vpop.f32.mrb[0].mxu0
  %v6328 = vadd.f32 %v6287, %v6327
  %v6329 = vpop.f32.mrb[0].mxu0
  %6330 = vdwg.mxu0
  %6331 = vmatprep.subr.bf16.mxu0 0
  %6332 = vmatpush1.bf16.msra.mxu0 %v4626
  %6333 = vmatprep.subr.bf16.mxu0 0
  %6334 = vmatpush1.bf16.msra.mxu0 %v4627
  %6335 = vmatprep.subr.bf16.mxu0 0
  %6336 = vmatpush1.bf16.msra.mxu0 %v4628
  %6337 = vmatprep.subr.bf16.mxu0 0
  %6338 = vmatpush1.bf16.msra.mxu0 %v4629
  %6339 = vmatprep.subr.bf16.mxu0 0
  %6340 = vmatpush1.bf16.msra.mxu0 %v4630
  %6341 = vmatprep.subr.bf16.mxu0 0
  %6342 = vmatpush1.bf16.msra.mxu0 %v4631
  %6343 = vmatprep.subr.bf16.mxu0 0
  %6344 = vmatpush1.bf16.msra.mxu0 %v4632
  %6345 = vmatprep.subr.bf16.mxu0 0
  %6346 = vmatpush1.bf16.msra.mxu0 %v4633
  %6347 = vmatprep.subr.bf16.mxu0 0
  %6348 = vmatpush1.bf16.msra.mxu0 %v4634
  %6349 = vmatprep.subr.bf16.mxu0 0
  %6350 = vmatpush1.bf16.msra.mxu0 %v4635
  %6351 = vmatprep.subr.bf16.mxu0 0
  %6352 = vmatpush1.bf16.msra.mxu0 %v4636
  %6353 = vmatprep.subr.bf16.mxu0 0
  %6354 = vmatpush1.bf16.msra.mxu0 %v4637
  %6355 = vmatprep.subr.bf16.mxu0 0
  %6356 = vmatpush1.bf16.msra.mxu0 %v4638
  %6357 = vmatprep.subr.bf16.mxu0 0
  %6358 = vmatpush1.bf16.msra.mxu0 %v4639
  %6359 = vmatprep.subr.bf16.mxu0 0
  %6360 = vmatpush1.bf16.msra.mxu0 %v4640
  %6361 = vmatprep.subr.bf16.mxu0 0
  %6362 = vmatpush1.bf16.msra.mxu0 %v4641
  %6363 = vmatprep.mubr.bf16.mxu0 %v1669
  %6364 = vmatmul.mubr.bf16.gmra.mrb[0].mxu0 %v1668
  %v6365 = vpop.f32.mrb[0].mxu0
  %v6366 = vadd.f32 %v6325, %v6365
  %v6367 = vpop.f32.mrb[0].mxu0
  %v6368 = vpop.f32.mrb[0].mxu0
  %v6369 = vadd.f32 %v6328, %v6368
  %v6370 = vpop.f32.mrb[0].mxu0
  %6371 = vdwg.mxu0
  %6372 = vmatprep.subr.bf16.mxu0 0
  %6373 = vmatpush1.bf16.msra.mxu0 %v4642
  %6374 = vmatprep.subr.bf16.mxu0 0
  %6375 = vmatpush1.bf16.msra.mxu0 %v4643
  %6376 = vmatprep.subr.bf16.mxu0 0
  %6377 = vmatpush1.bf16.msra.mxu0 %v4644
  %6378 = vmatprep.subr.bf16.mxu0 0
  %6379 = vmatpush1.bf16.msra.mxu0 %v4645
  %6380 = vmatprep.subr.bf16.mxu0 0
  %6381 = vmatpush1.bf16.msra.mxu0 %v4646
  %6382 = vmatprep.subr.bf16.mxu0 0
  %6383 = vmatpush1.bf16.msra.mxu0 %v4647
  %6384 = vmatprep.subr.bf16.mxu0 0
  %6385 = vmatpush1.bf16.msra.mxu0 %v4648
  %6386 = vmatprep.subr.bf16.mxu0 0
  %6387 = vmatpush1.bf16.msra.mxu0 %v4649
  %6388 = vmatprep.subr.bf16.mxu0 0
  %6389 = vmatpush1.bf16.msra.mxu0 %v4650
  %6390 = vmatprep.subr.bf16.mxu0 0
  %6391 = vmatpush1.bf16.msra.mxu0 %v4651
  %6392 = vmatprep.subr.bf16.mxu0 0
  %6393 = vmatpush1.bf16.msra.mxu0 %v4652
  %6394 = vmatprep.subr.bf16.mxu0 0
  %6395 = vmatpush1.bf16.msra.mxu0 %v4653
  %6396 = vmatprep.subr.bf16.mxu0 0
  %6397 = vmatpush1.bf16.msra.mxu0 %v4654
  %6398 = vmatprep.subr.bf16.mxu0 0
  %6399 = vmatpush1.bf16.msra.mxu0 %v4655
  %6400 = vmatprep.subr.bf16.mxu0 0
  %6401 = vmatpush1.bf16.msra.mxu0 %v4656
  %6402 = vmatprep.subr.bf16.mxu0 0
  %6403 = vmatpush1.bf16.msra.mxu0 %v4657
  %6404 = vmatprep.mubr.bf16.mxu0 %v1671
  %6405 = vmatmul.mubr.bf16.gmra.mrb[0].mxu0 %v1670
  %v6406 = vpop.f32.mrb[0].mxu0
  %v6407 = vadd.f32 %v6366, %v6406
  %v6408 = vpop.f32.mrb[0].mxu0
  %v6409 = vpop.f32.mrb[0].mxu0
  %v6410 = vadd.f32 %v6369, %v6409
  %v6411 = vpop.f32.mrb[0].mxu0
  %6412 = vdwg.mxu0
  %6413 = vmatprep.subr.bf16.mxu0 0
  %6414 = vmatpush1.bf16.msra.mxu0 %v4658
  %6415 = vmatprep.subr.bf16.mxu0 0
  %6416 = vmatpush1.bf16.msra.mxu0 %v4659
  %6417 = vmatprep.subr.bf16.mxu0 0
  %6418 = vmatpush1.bf16.msra.mxu0 %v4660
  %6419 = vmatprep.subr.bf16.mxu0 0
  %6420 = vmatpush1.bf16.msra.mxu0 %v4661
  %6421 = vmatprep.subr.bf16.mxu0 0
  %6422 = vmatpush1.bf16.msra.mxu0 %v4662
  %6423 = vmatprep.subr.bf16.mxu0 0
  %6424 = vmatpush1.bf16.msra.mxu0 %v4663
  %6425 = vmatprep.subr.bf16.mxu0 0
  %6426 = vmatpush1.bf16.msra.mxu0 %v4664
  %6427 = vmatprep.subr.bf16.mxu0 0
  %6428 = vmatpush1.bf16.msra.mxu0 %v4665
  %6429 = vmatprep.subr.bf16.mxu0 0
  %6430 = vmatpush1.bf16.msra.mxu0 %v4666
  %6431 = vmatprep.subr.bf16.mxu0 0
  %6432 = vmatpush1.bf16.msra.mxu0 %v4667
  %6433 = vmatprep.subr.bf16.mxu0 0
  %6434 = vmatpush1.bf16.msra.mxu0 %v4668
  %6435 = vmatprep.subr.bf16.mxu0 0
  %6436 = vmatpush1.bf16.msra.mxu0 %v4669
  %6437 = vmatprep.subr.bf16.mxu0 0
  %6438 = vmatpush1.bf16.msra.mxu0 %v4670
  %6439 = vmatprep.subr.bf16.mxu0 0
  %6440 = vmatpush1.bf16.msra.mxu0 %v4671
  %6441 = vmatprep.subr.bf16.mxu0 0
  %6442 = vmatpush1.bf16.msra.mxu0 %v4672
  %6443 = vmatprep.subr.bf16.mxu0 0
  %6444 = vmatpush1.bf16.msra.mxu0 %v4673
  %6445 = vmatprep.mubr.bf16.mxu0 %v1673
  %6446 = vmatmul.mubr.bf16.gmra.mrb[0].mxu0 %v1672
  %v6447 = vpop.f32.mrb[0].mxu0
  %v6448 = vadd.f32 %v6407, %v6447
  %v6449 = vpop.f32.mrb[0].mxu0
  %v6450 = vpop.f32.mrb[0].mxu0
  %v6451 = vadd.f32 %v6410, %v6450
  %v6452 = vpop.f32.mrb[0].mxu0
  %6453 = vdwg.mxu0
  %6454 = vmatprep.subr.bf16.mxu0 0
  %6455 = vmatpush1.bf16.msra.mxu0 %v4674
  %6456 = vmatprep.subr.bf16.mxu0 0
  %6457 = vmatpush1.bf16.msra.mxu0 %v4675
  %6458 = vmatprep.subr.bf16.mxu0 0
  %6459 = vmatpush1.bf16.msra.mxu0 %v4676
  %6460 = vmatprep.subr.bf16.mxu0 0
  %6461 = vmatpush1.bf16.msra.mxu0 %v4677
  %6462 = vmatprep.subr.bf16.mxu0 0
  %6463 = vmatpush1.bf16.msra.mxu0 %v4678
  %6464 = vmatprep.subr.bf16.mxu0 0
  %6465 = vmatpush1.bf16.msra.mxu0 %v4679
  %6466 = vmatprep.subr.bf16.mxu0 0
  %6467 = vmatpush1.bf16.msra.mxu0 %v4680
  %6468 = vmatprep.subr.bf16.mxu0 0
  %6469 = vmatpush1.bf16.msra.mxu0 %v4681
  %6470 = vmatprep.subr.bf16.mxu0 0
  %6471 = vmatpush1.bf16.msra.mxu0 %v4682
  %6472 = vmatprep.subr.bf16.mxu0 0
  %6473 = vmatpush1.bf16.msra.mxu0 %v4683
  %6474 = vmatprep.subr.bf16.mxu0 0
  %6475 = vmatpush1.bf16.msra.mxu0 %v4684
  %6476 = vmatprep.subr.bf16.mxu0 0
  %6477 = vmatpush1.bf16.msra.mxu0 %v4685
  %6478 = vmatprep.subr.bf16.mxu0 0
  %6479 = vmatpush1.bf16.msra.mxu0 %v4686
  %6480 = vmatprep.subr.bf16.mxu0 0
  %6481 = vmatpush1.bf16.msra.mxu0 %v4687
  %6482 = vmatprep.subr.bf16.mxu0 0
  %6483 = vmatpush1.bf16.msra.mxu0 %v4688
  %6484 = vmatprep.subr.bf16.mxu0 0
  %6485 = vmatpush1.bf16.msra.mxu0 %v4689
  %6486 = vmatprep.mubr.bf16.mxu0 %v1675
  %6487 = vmatmul.mubr.bf16.gmra.mrb[0].mxu0 %v1674
  %v6488 = vpop.f32.mrb[0].mxu0
  %v6489 = vadd.f32 %v6448, %v6488
  %v6490 = vpop.f32.mrb[0].mxu0
  %v6491 = vpop.f32.mrb[0].mxu0
  %v6492 = vadd.f32 %v6451, %v6491
  %v6493 = vpop.f32.mrb[0].mxu0
  %6494 = vdwg.mxu0
  %6495 = vmatprep.subr.bf16.mxu0 0
  %6496 = vmatpush1.bf16.msra.mxu0 %v4690
  %6497 = vmatprep.subr.bf16.mxu0 0
  %6498 = vmatpush1.bf16.msra.mxu0 %v4691
  %6499 = vmatprep.subr.bf16.mxu0 0
  %6500 = vmatpush1.bf16.msra.mxu0 %v4692
  %6501 = vmatprep.subr.bf16.mxu0 0
  %6502 = vmatpush1.bf16.msra.mxu0 %v4693
  %6503 = vmatprep.subr.bf16.mxu0 0
  %6504 = vmatpush1.bf16.msra.mxu0 %v4694
  %6505 = vmatprep.subr.bf16.mxu0 0
  %6506 = vmatpush1.bf16.msra.mxu0 %v4695
  %6507 = vmatprep.subr.bf16.mxu0 0
  %6508 = vmatpush1.bf16.msra.mxu0 %v4696
  %6509 = vmatprep.subr.bf16.mxu0 0
  %6510 = vmatpush1.bf16.msra.mxu0 %v4697
  %6511 = vmatprep.subr.bf16.mxu0 0
  %6512 = vmatpush1.bf16.msra.mxu0 %v4698
  %6513 = vmatprep.subr.bf16.mxu0 0
  %6514 = vmatpush1.bf16.msra.mxu0 %v4699
  %6515 = vmatprep.subr.bf16.mxu0 0
  %6516 = vmatpush1.bf16.msra.mxu0 %v4700
  %6517 = vmatprep.subr.bf16.mxu0 0
  %6518 = vmatpush1.bf16.msra.mxu0 %v4701
  %6519 = vmatprep.subr.bf16.mxu0 0
  %6520 = vmatpush1.bf16.msra.mxu0 %v4702
  %6521 = vmatprep.subr.bf16.mxu0 0
  %6522 = vmatpush1.bf16.msra.mxu0 %v4703
  %6523 = vmatprep.subr.bf16.mxu0 0
  %6524 = vmatpush1.bf16.msra.mxu0 %v4704
  %6525 = vmatprep.subr.bf16.mxu0 0
  %6526 = vmatpush1.bf16.msra.mxu0 %v4705
  %6527 = vmatprep.mubr.bf16.mxu0 %v1677
  %6528 = vmatmul.mubr.bf16.gmra.mrb[0].mxu0 %v1676
  %v6529 = vpop.f32.mrb[0].mxu0
  %v6530 = vadd.f32 %v6489, %v6529
  %v6531 = vpop.f32.mrb[0].mxu0
  %v6532 = vpop.f32.mrb[0].mxu0
  %v6533 = vadd.f32 %v6492, %v6532
  %v6534 = vpop.f32.mrb[0].mxu0
  %6535 = vdwg.mxu0
  %6536 = vmatprep.subr.bf16.mxu0 0
  %6537 = vmatpush1.bf16.msra.mxu0 %v4706
  %6538 = vmatprep.subr.bf16.mxu0 0
  %6539 = vmatpush1.bf16.msra.mxu0 %v4707
  %6540 = vmatprep.subr.bf16.mxu0 0
  %6541 = vmatpush1.bf16.msra.mxu0 %v4708
  %6542 = vmatprep.subr.bf16.mxu0 0
  %6543 = vmatpush1.bf16.msra.mxu0 %v4709
  %6544 = vmatprep.subr.bf16.mxu0 0
  %6545 = vmatpush1.bf16.msra.mxu0 %v4710
  %6546 = vmatprep.subr.bf16.mxu0 0
  %6547 = vmatpush1.bf16.msra.mxu0 %v4711
  %6548 = vmatprep.subr.bf16.mxu0 0
  %6549 = vmatpush1.bf16.msra.mxu0 %v4712
  %6550 = vmatprep.subr.bf16.mxu0 0
  %6551 = vmatpush1.bf16.msra.mxu0 %v4713
  %6552 = vmatprep.subr.bf16.mxu0 0
  %6553 = vmatpush1.bf16.msra.mxu0 %v4714
  %6554 = vmatprep.subr.bf16.mxu0 0
  %6555 = vmatpush1.bf16.msra.mxu0 %v4715
  %6556 = vmatprep.subr.bf16.mxu0 0
  %6557 = vmatpush1.bf16.msra.mxu0 %v4716
  %6558 = vmatprep.subr.bf16.mxu0 0
  %6559 = vmatpush1.bf16.msra.mxu0 %v4717
  %6560 = vmatprep.subr.bf16.mxu0 0
  %6561 = vmatpush1.bf16.msra.mxu0 %v4718
  %6562 = vmatprep.subr.bf16.mxu0 0
  %6563 = vmatpush1.bf16.msra.mxu0 %v4719
  %6564 = vmatprep.subr.bf16.mxu0 0
  %6565 = vmatpush1.bf16.msra.mxu0 %v4720
  %6566 = vmatprep.subr.bf16.mxu0 0
  %6567 = vmatpush1.bf16.msra.mxu0 %v4721
  %6568 = vmatprep.mubr.bf16.mxu0 %v1679
  %6569 = vmatmul.mubr.bf16.gmra.mrb[0].mxu0 %v1678
  %v6570 = vpop.f32.mrb[0].mxu0
  %v6571 = vadd.f32 %v6530, %v6570
  %v6572 = vpop.f32.mrb[0].mxu0
  %v6573 = vpop.f32.mrb[0].mxu0
  %v6574 = vadd.f32 %v6533, %v6573
  %v6575 = vpop.f32.mrb[0].mxu0
  %6576 = vdwg.mxu0
  %6577 = vmatprep.subr.bf16.mxu0 0
  %6578 = vmatpush1.bf16.msra.mxu0 %v4722
  %6579 = vmatprep.subr.bf16.mxu0 0
  %6580 = vmatpush1.bf16.msra.mxu0 %v4723
  %6581 = vmatprep.subr.bf16.mxu0 0
  %6582 = vmatpush1.bf16.msra.mxu0 %v4724
  %6583 = vmatprep.subr.bf16.mxu0 0
  %6584 = vmatpush1.bf16.msra.mxu0 %v4725
  %6585 = vmatprep.subr.bf16.mxu0 0
  %6586 = vmatpush1.bf16.msra.mxu0 %v4726
  %6587 = vmatprep.subr.bf16.mxu0 0
  %6588 = vmatpush1.bf16.msra.mxu0 %v4727
  %6589 = vmatprep.subr.bf16.mxu0 0
  %6590 = vmatpush1.bf16.msra.mxu0 %v4728
  %6591 = vmatprep.subr.bf16.mxu0 0
  %6592 = vmatpush1.bf16.msra.mxu0 %v4729
  %6593 = vmatprep.subr.bf16.mxu0 0
  %6594 = vmatpush1.bf16.msra.mxu0 %v4730
  %6595 = vmatprep.subr.bf16.mxu0 0
  %6596 = vmatpush1.bf16.msra.mxu0 %v4731
  %6597 = vmatprep.subr.bf16.mxu0 0
  %6598 = vmatpush1.bf16.msra.mxu0 %v4732
  %6599 = vmatprep.subr.bf16.mxu0 0
  %6600 = vmatpush1.bf16.msra.mxu0 %v4733
  %6601 = vmatprep.subr.bf16.mxu0 0
  %6602 = vmatpush1.bf16.msra.mxu0 %v4734
  %6603 = vmatprep.subr.bf16.mxu0 0
  %6604 = vmatpush1.bf16.msra.mxu0 %v4735
  %6605 = vmatprep.subr.bf16.mxu0 0
  %6606 = vmatpush1.bf16.msra.mxu0 %v4736
  %6607 = vmatprep.subr.bf16.mxu0 0
  %6608 = vmatpush1.bf16.msra.mxu0 %v4737
  %6609 = vmatprep.mubr.bf16.mxu0 %v1681
  %6610 = vmatmul.mubr.bf16.gmra.mrb[0].mxu0 %v1680
  %v6611 = vpop.f32.mrb[0].mxu0
  %v6612 = vadd.f32 %v6571, %v6611
  %v6613 = vpop.f32.mrb[0].mxu0
  %v6614 = vpop.f32.mrb[0].mxu0
  %v6615 = vadd.f32 %v6574, %v6614
  %v6616 = vpop.f32.mrb[0].mxu0
  %6617 = vdwg.mxu0
  %6618 = vmatprep.subr.bf16.mxu0 0
  %6619 = vmatpush1.bf16.msra.mxu0 %v4738
  %6620 = vmatprep.subr.bf16.mxu0 0
  %6621 = vmatpush1.bf16.msra.mxu0 %v4739
  %6622 = vmatprep.subr.bf16.mxu0 0
  %6623 = vmatpush1.bf16.msra.mxu0 %v4740
  %6624 = vmatprep.subr.bf16.mxu0 0
  %6625 = vmatpush1.bf16.msra.mxu0 %v4741
  %6626 = vmatprep.subr.bf16.mxu0 0
  %6627 = vmatpush1.bf16.msra.mxu0 %v4742
  %6628 = vmatprep.subr.bf16.mxu0 0
  %6629 = vmatpush1.bf16.msra.mxu0 %v4743
  %6630 = vmatprep.subr.bf16.mxu0 0
  %6631 = vmatpush1.bf16.msra.mxu0 %v4744
  %6632 = vmatprep.subr.bf16.mxu0 0
  %6633 = vmatpush1.bf16.msra.mxu0 %v4745
  %6634 = vmatprep.subr.bf16.mxu0 0
  %6635 = vmatpush1.bf16.msra.mxu0 %v4746
  %6636 = vmatprep.subr.bf16.mxu0 0
  %6637 = vmatpush1.bf16.msra.mxu0 %v4747
  %6638 = vmatprep.subr.bf16.mxu0 0
  %6639 = vmatpush1.bf16.msra.mxu0 %v4748
  %6640 = vmatprep.subr.bf16.mxu0 0
  %6641 = vmatpush1.bf16.msra.mxu0 %v4749
  %6642 = vmatprep.subr.bf16.mxu0 0
  %6643 = vmatpush1.bf16.msra.mxu0 %v4750
  %6644 = vmatprep.subr.bf16.mxu0 0
  %6645 = vmatpush1.bf16.msra.mxu0 %v4751
  %6646 = vmatprep.subr.bf16.mxu0 0
  %6647 = vmatpush1.bf16.msra.mxu0 %v4752
  %6648 = vmatprep.subr.bf16.mxu0 0
  %6649 = vmatpush1.bf16.msra.mxu0 %v4753
  %6650 = vmatprep.mubr.bf16.mxu0 %v1683
  %6651 = vmatmul.mubr.bf16.gmra.mrb[0].mxu0 %v1682
  %v6652 = vpop.f32.mrb[0].mxu0
  %v6653 = vadd.f32 %v6612, %v6652
  %v6654 = vpop.f32.mrb[0].mxu0
  %v6655 = vpop.f32.mrb[0].mxu0
  %v6656 = vadd.f32 %v6615, %v6655
  %v6657 = vpop.f32.mrb[0].mxu0
  %6658 = vdwg.mxu0
  %6659 = vmatprep.subr.bf16.mxu0 0
  %6660 = vmatpush1.bf16.msra.mxu0 %v4754
  %6661 = vmatprep.subr.bf16.mxu0 0
  %6662 = vmatpush1.bf16.msra.mxu0 %v4755
  %6663 = vmatprep.subr.bf16.mxu0 0
  %6664 = vmatpush1.bf16.msra.mxu0 %v4756
  %6665 = vmatprep.subr.bf16.mxu0 0
  %6666 = vmatpush1.bf16.msra.mxu0 %v4757
  %6667 = vmatprep.subr.bf16.mxu0 0
  %6668 = vmatpush1.bf16.msra.mxu0 %v4758
  %6669 = vmatprep.subr.bf16.mxu0 0
  %6670 = vmatpush1.bf16.msra.mxu0 %v4759
  %6671 = vmatprep.subr.bf16.mxu0 0
  %6672 = vmatpush1.bf16.msra.mxu0 %v4760
  %6673 = vmatprep.subr.bf16.mxu0 0
  %6674 = vmatpush1.bf16.msra.mxu0 %v4761
  %6675 = vmatprep.subr.bf16.mxu0 0
  %6676 = vmatpush1.bf16.msra.mxu0 %v4762
  %6677 = vmatprep.subr.bf16.mxu0 0
  %6678 = vmatpush1.bf16.msra.mxu0 %v4763
  %6679 = vmatprep.subr.bf16.mxu0 0
  %6680 = vmatpush1.bf16.msra.mxu0 %v4764
  %6681 = vmatprep.subr.bf16.mxu0 0
  %6682 = vmatpush1.bf16.msra.mxu0 %v4765
  %6683 = vmatprep.subr.bf16.mxu0 0
  %6684 = vmatpush1.bf16.msra.mxu0 %v4766
  %6685 = vmatprep.subr.bf16.mxu0 0
  %6686 = vmatpush1.bf16.msra.mxu0 %v4767
  %6687 = vmatprep.subr.bf16.mxu0 0
  %6688 = vmatpush1.bf16.msra.mxu0 %v4768
  %6689 = vmatprep.subr.bf16.mxu0 0
  %6690 = vmatpush1.bf16.msra.mxu0 %v4769
  %6691 = vmatprep.mubr.bf16.mxu0 %v1685
  %6692 = vmatmul.mubr.bf16.gmra.mrb[0].mxu0 %v1684
  %v6693 = vpop.f32.mrb[0].mxu0
  %v6694 = vadd.f32 %v6653, %v6693
  %v6695 = vpop.f32.mrb[0].mxu0
  %v6696 = vpop.f32.mrb[0].mxu0
  %v6697 = vadd.f32 %v6656, %v6696
  %v6698 = vpop.f32.mrb[0].mxu0
  %6699 = vdwg.mxu0
  %6700 = vmatprep.subr.bf16.mxu0 0
  %6701 = vmatpush1.bf16.msra.mxu0 %v4770
  %6702 = vmatprep.subr.bf16.mxu0 0
  %6703 = vmatpush1.bf16.msra.mxu0 %v4771
  %6704 = vmatprep.subr.bf16.mxu0 0
  %6705 = vmatpush1.bf16.msra.mxu0 %v4772
  %6706 = vmatprep.subr.bf16.mxu0 0
  %6707 = vmatpush1.bf16.msra.mxu0 %v4773
  %6708 = vmatprep.subr.bf16.mxu0 0
  %6709 = vmatpush1.bf16.msra.mxu0 %v4774
  %6710 = vmatprep.subr.bf16.mxu0 0
  %6711 = vmatpush1.bf16.msra.mxu0 %v4775
  %6712 = vmatprep.subr.bf16.mxu0 0
  %6713 = vmatpush1.bf16.msra.mxu0 %v4776
  %6714 = vmatprep.subr.bf16.mxu0 0
  %6715 = vmatpush1.bf16.msra.mxu0 %v4777
  %6716 = vmatprep.subr.bf16.mxu0 0
  %6717 = vmatpush1.bf16.msra.mxu0 %v4778
  %6718 = vmatprep.subr.bf16.mxu0 0
  %6719 = vmatpush1.bf16.msra.mxu0 %v4779
  %6720 = vmatprep.subr.bf16.mxu0 0
  %6721 = vmatpush1.bf16.msra.mxu0 %v4780
  %6722 = vmatprep.subr.bf16.mxu0 0
  %6723 = vmatpush1.bf16.msra.mxu0 %v4781
  %6724 = vmatprep.subr.bf16.mxu0 0
  %6725 = vmatpush1.bf16.msra.mxu0 %v4782
  %6726 = vmatprep.subr.bf16.mxu0 0
  %6727 = vmatpush1.bf16.msra.mxu0 %v4783
  %6728 = vmatprep.subr.bf16.mxu0 0
  %6729 = vmatpush1.bf16.msra.mxu0 %v4784
  %6730 = vmatprep.subr.bf16.mxu0 0
  %6731 = vmatpush1.bf16.msra.mxu0 %v4785
  %6732 = vmatprep.mubr.bf16.mxu0 %v1687
  %6733 = vmatmul.mubr.bf16.gmra.mrb[0].mxu0 %v1686
  %v6734 = vpop.f32.mrb[0].mxu0
  %v6735 = vadd.f32 %v6694, %v6734
  %v6736 = vpop.f32.mrb[0].mxu0
  %v6737 = vpop.f32.mrb[0].mxu0
  %v6738 = vadd.f32 %v6697, %v6737
  %v6739 = vpop.f32.mrb[0].mxu0
  %6740 = vdwg.mxu0
  %6741 = vmatprep.subr.bf16.mxu0 0
  %6742 = vmatpush1.bf16.msra.mxu0 %v4786
  %6743 = vmatprep.subr.bf16.mxu0 0
  %6744 = vmatpush1.bf16.msra.mxu0 %v4787
  %6745 = vmatprep.subr.bf16.mxu0 0
  %6746 = vmatpush1.bf16.msra.mxu0 %v4788
  %6747 = vmatprep.subr.bf16.mxu0 0
  %6748 = vmatpush1.bf16.msra.mxu0 %v4789
  %6749 = vmatprep.subr.bf16.mxu0 0
  %6750 = vmatpush1.bf16.msra.mxu0 %v4790
  %6751 = vmatprep.subr.bf16.mxu0 0
  %6752 = vmatpush1.bf16.msra.mxu0 %v4791
  %6753 = vmatprep.subr.bf16.mxu0 0
  %6754 = vmatpush1.bf16.msra.mxu0 %v4792
  %6755 = vmatprep.subr.bf16.mxu0 0
  %6756 = vmatpush1.bf16.msra.mxu0 %v4793
  %6757 = vmatprep.subr.bf16.mxu0 0
  %6758 = vmatpush1.bf16.msra.mxu0 %v4794
  %6759 = vmatprep.subr.bf16.mxu0 0
  %6760 = vmatpush1.bf16.msra.mxu0 %v4795
  %6761 = vmatprep.subr.bf16.mxu0 0
  %6762 = vmatpush1.bf16.msra.mxu0 %v4796
  %6763 = vmatprep.subr.bf16.mxu0 0
  %6764 = vmatpush1.bf16.msra.mxu0 %v4797
  %6765 = vmatprep.subr.bf16.mxu0 0
  %6766 = vmatpush1.bf16.msra.mxu0 %v4798
  %6767 = vmatprep.subr.bf16.mxu0 0
  %6768 = vmatpush1.bf16.msra.mxu0 %v4799
  %6769 = vmatprep.subr.bf16.mxu0 0
  %6770 = vmatpush1.bf16.msra.mxu0 %v4800
  %6771 = vmatprep.subr.bf16.mxu0 0
  %6772 = vmatpush1.bf16.msra.mxu0 %v4801
  %6773 = vmatprep.mubr.bf16.mxu0 %v1689
  %6774 = vmatmul.mubr.bf16.gmra.mrb[0].mxu0 %v1688
  %v6775 = vpop.f32.mrb[0].mxu0
  %v6776 = vadd.f32 %v6735, %v6775
  %v6777 = vpop.f32.mrb[0].mxu0
  %v6778 = vpop.f32.mrb[0].mxu0
  %v6779 = vadd.f32 %v6738, %v6778
  %v6780 = vpop.f32.mrb[0].mxu0
  %6781 = vdwg.mxu0
  %6782 = vmatprep.subr.bf16.mxu0 0
  %6783 = vmatpush1.bf16.msra.mxu0 %v4802
  %6784 = vmatprep.subr.bf16.mxu0 0
  %6785 = vmatpush1.bf16.msra.mxu0 %v4803
  %6786 = vmatprep.subr.bf16.mxu0 0
  %6787 = vmatpush1.bf16.msra.mxu0 %v4804
  %6788 = vmatprep.subr.bf16.mxu0 0
  %6789 = vmatpush1.bf16.msra.mxu0 %v4805
  %6790 = vmatprep.subr.bf16.mxu0 0
  %6791 = vmatpush1.bf16.msra.mxu0 %v4806
  %6792 = vmatprep.subr.bf16.mxu0 0
  %6793 = vmatpush1.bf16.msra.mxu0 %v4807
  %6794 = vmatprep.subr.bf16.mxu0 0
  %6795 = vmatpush1.bf16.msra.mxu0 %v4808
  %6796 = vmatprep.subr.bf16.mxu0 0
  %6797 = vmatpush1.bf16.msra.mxu0 %v4809
  %6798 = vmatprep.subr.bf16.mxu0 0
  %6799 = vmatpush1.bf16.msra.mxu0 %v4810
  %6800 = vmatprep.subr.bf16.mxu0 0
  %6801 = vmatpush1.bf16.msra.mxu0 %v4811
  %6802 = vmatprep.subr.bf16.mxu0 0
  %6803 = vmatpush1.bf16.msra.mxu0 %v4812
  %6804 = vmatprep.subr.bf16.mxu0 0
  %6805 = vmatpush1.bf16.msra.mxu0 %v4813
  %6806 = vmatprep.subr.bf16.mxu0 0
  %6807 = vmatpush1.bf16.msra.mxu0 %v4814
  %6808 = vmatprep.subr.bf16.mxu0 0
  %6809 = vmatpush1.bf16.msra.mxu0 %v4815
  %6810 = vmatprep.subr.bf16.mxu0 0
  %6811 = vmatpush1.bf16.msra.mxu0 %v4816
  %6812 = vmatprep.subr.bf16.mxu0 0
  %6813 = vmatpush1.bf16.msra.mxu0 %v4817
  %6814 = vmatprep.mubr.bf16.mxu0 %v1691
  %6815 = vmatmul.mubr.bf16.gmra.mrb[0].mxu0 %v1690
  %v6816 = vpop.f32.mrb[0].mxu0
  %v6817 = vadd.f32 %v6776, %v6816
  %v6818 = vpop.f32.mrb[0].mxu0
  %v6819 = vpop.f32.mrb[0].mxu0
  %v6820 = vadd.f32 %v6779, %v6819
  %v6821 = vpop.f32.mrb[0].mxu0
  %6822 = vdwg.mxu0
  %6823 = vmatprep.subr.bf16.mxu0 0
  %6824 = vmatpush1.bf16.msra.mxu0 %v4818
  %6825 = vmatprep.subr.bf16.mxu0 0
  %6826 = vmatpush1.bf16.msra.mxu0 %v4819
  %6827 = vmatprep.subr.bf16.mxu0 0
  %6828 = vmatpush1.bf16.msra.mxu0 %v4820
  %6829 = vmatprep.subr.bf16.mxu0 0
  %6830 = vmatpush1.bf16.msra.mxu0 %v4821
  %6831 = vmatprep.subr.bf16.mxu0 0
  %6832 = vmatpush1.bf16.msra.mxu0 %v4822
  %6833 = vmatprep.subr.bf16.mxu0 0
  %6834 = vmatpush1.bf16.msra.mxu0 %v4823
  %6835 = vmatprep.subr.bf16.mxu0 0
  %6836 = vmatpush1.bf16.msra.mxu0 %v4824
  %6837 = vmatprep.subr.bf16.mxu0 0
  %6838 = vmatpush1.bf16.msra.mxu0 %v4825
  %6839 = vmatprep.subr.bf16.mxu0 0
  %6840 = vmatpush1.bf16.msra.mxu0 %v4826
  %6841 = vmatprep.subr.bf16.mxu0 0
  %6842 = vmatpush1.bf16.msra.mxu0 %v4827
  %6843 = vmatprep.subr.bf16.mxu0 0
  %6844 = vmatpush1.bf16.msra.mxu0 %v4828
  %6845 = vmatprep.subr.bf16.mxu0 0
  %6846 = vmatpush1.bf16.msra.mxu0 %v4829
  %6847 = vmatprep.subr.bf16.mxu0 0
  %6848 = vmatpush1.bf16.msra.mxu0 %v4830
  %6849 = vmatprep.subr.bf16.mxu0 0
  %6850 = vmatpush1.bf16.msra.mxu0 %v4831
  %6851 = vmatprep.subr.bf16.mxu0 0
  %6852 = vmatpush1.bf16.msra.mxu0 %v4832
  %6853 = vmatprep.subr.bf16.mxu0 0
  %6854 = vmatpush1.bf16.msra.mxu0 %v4833
  %6855 = vmatprep.mubr.bf16.mxu0 %v1693
  %6856 = vmatmul.mubr.bf16.gmra.mrb[0].mxu0 %v1692
  %v6857 = vpop.f32.mrb[0].mxu0
  %v6858 = vadd.f32 %v6817, %v6857
  %v6859 = vpop.f32.mrb[0].mxu0
  %v6860 = vpop.f32.mrb[0].mxu0
  %v6861 = vadd.f32 %v6820, %v6860
  %v6862 = vpop.f32.mrb[0].mxu0
  %6863 = vdwg.mxu0
  %6864 = vmatprep.subr.bf16.mxu0 0
  %6865 = vmatpush1.bf16.msra.mxu0 %v4834
  %6866 = vmatprep.subr.bf16.mxu0 0
  %6867 = vmatpush1.bf16.msra.mxu0 %v4835
  %6868 = vmatprep.subr.bf16.mxu0 0
  %6869 = vmatpush1.bf16.msra.mxu0 %v4836
  %6870 = vmatprep.subr.bf16.mxu0 0
  %6871 = vmatpush1.bf16.msra.mxu0 %v4837
  %6872 = vmatprep.subr.bf16.mxu0 0
  %6873 = vmatpush1.bf16.msra.mxu0 %v4838
  %6874 = vmatprep.subr.bf16.mxu0 0
  %6875 = vmatpush1.bf16.msra.mxu0 %v4839
  %6876 = vmatprep.subr.bf16.mxu0 0
  %6877 = vmatpush1.bf16.msra.mxu0 %v4840
  %6878 = vmatprep.subr.bf16.mxu0 0
  %6879 = vmatpush1.bf16.msra.mxu0 %v4841
  %6880 = vmatprep.subr.bf16.mxu0 0
  %6881 = vmatpush1.bf16.msra.mxu0 %v4842
  %6882 = vmatprep.subr.bf16.mxu0 0
  %6883 = vmatpush1.bf16.msra.mxu0 %v4843
  %6884 = vmatprep.subr.bf16.mxu0 0
  %6885 = vmatpush1.bf16.msra.mxu0 %v4844
  %6886 = vmatprep.subr.bf16.mxu0 0
  %6887 = vmatpush1.bf16.msra.mxu0 %v4845
  %6888 = vmatprep.subr.bf16.mxu0 0
  %6889 = vmatpush1.bf16.msra.mxu0 %v4846
  %6890 = vmatprep.subr.bf16.mxu0 0
  %6891 = vmatpush1.bf16.msra.mxu0 %v4847
  %6892 = vmatprep.subr.bf16.mxu0 0
  %6893 = vmatpush1.bf16.msra.mxu0 %v4848
  %6894 = vmatprep.subr.bf16.mxu0 0
  %6895 = vmatpush1.bf16.msra.mxu0 %v4849
  %6896 = vmatprep.mubr.bf16.mxu0 %v1695
  %6897 = vmatmul.mubr.bf16.gmra.mrb[0].mxu0 %v1694
  %v6898 = vpop.f32.mrb[0].mxu0
  %v6899 = vadd.f32 %v6858, %v6898
  %v6900 = vpop.f32.mrb[0].mxu0
  %v6901 = vpop.f32.mrb[0].mxu0
  %v6902 = vadd.f32 %v6861, %v6901
  %v6903 = vpop.f32.mrb[0].mxu0
  %6904 = vdwg.mxu0
  %6905 = vmatprep.subr.bf16.mxu0 0
  %6906 = vmatpush1.bf16.msra.mxu0 %v4850
  %6907 = vmatprep.subr.bf16.mxu0 0
  %6908 = vmatpush1.bf16.msra.mxu0 %v4851
  %6909 = vmatprep.subr.bf16.mxu0 0
  %6910 = vmatpush1.bf16.msra.mxu0 %v4852
  %6911 = vmatprep.subr.bf16.mxu0 0
  %6912 = vmatpush1.bf16.msra.mxu0 %v4853
  %6913 = vmatprep.subr.bf16.mxu0 0
  %6914 = vmatpush1.bf16.msra.mxu0 %v4854
  %6915 = vmatprep.subr.bf16.mxu0 0
  %6916 = vmatpush1.bf16.msra.mxu0 %v4855
  %6917 = vmatprep.subr.bf16.mxu0 0
  %6918 = vmatpush1.bf16.msra.mxu0 %v4856
  %6919 = vmatprep.subr.bf16.mxu0 0
  %6920 = vmatpush1.bf16.msra.mxu0 %v4857
  %6921 = vmatprep.subr.bf16.mxu0 0
  %6922 = vmatpush1.bf16.msra.mxu0 %v4858
  %6923 = vmatprep.subr.bf16.mxu0 0
  %6924 = vmatpush1.bf16.msra.mxu0 %v4859
  %6925 = vmatprep.subr.bf16.mxu0 0
  %6926 = vmatpush1.bf16.msra.mxu0 %v4860
  %6927 = vmatprep.subr.bf16.mxu0 0
  %6928 = vmatpush1.bf16.msra.mxu0 %v4861
  %6929 = vmatprep.subr.bf16.mxu0 0
  %6930 = vmatpush1.bf16.msra.mxu0 %v4862
  %6931 = vmatprep.subr.bf16.mxu0 0
  %6932 = vmatpush1.bf16.msra.mxu0 %v4863
  %6933 = vmatprep.subr.bf16.mxu0 0
  %6934 = vmatpush1.bf16.msra.mxu0 %v4864
  %6935 = vmatprep.subr.bf16.mxu0 0
  %6936 = vmatpush1.bf16.msra.mxu0 %v4865
  %6937 = vmatprep.mubr.bf16.mxu0 %v1697
  %6938 = vmatmul.mubr.bf16.gmra.mrb[0].mxu0 %v1696
  %v6939 = vpop.f32.mrb[0].mxu0
  %v6940 = vadd.f32 %v6899, %v6939
  %v6941 = vpop.f32.mrb[0].mxu0
  %v6942 = vpop.f32.mrb[0].mxu0
  %v6943 = vadd.f32 %v6902, %v6942
  %v6944 = vpop.f32.mrb[0].mxu0
  %6945 = vdwg.mxu0
  %6946 = vmatprep.subr.bf16.mxu0 0
  %6947 = vmatpush1.bf16.msra.mxu0 %v4866
  %6948 = vmatprep.subr.bf16.mxu0 0
  %6949 = vmatpush1.bf16.msra.mxu0 %v4867
  %6950 = vmatprep.subr.bf16.mxu0 0
  %6951 = vmatpush1.bf16.msra.mxu0 %v4868
  %6952 = vmatprep.subr.bf16.mxu0 0
  %6953 = vmatpush1.bf16.msra.mxu0 %v4869
  %6954 = vmatprep.subr.bf16.mxu0 0
  %6955 = vmatpush1.bf16.msra.mxu0 %v4870
  %6956 = vmatprep.subr.bf16.mxu0 0
  %6957 = vmatpush1.bf16.msra.mxu0 %v4871
  %6958 = vmatprep.subr.bf16.mxu0 0
  %6959 = vmatpush1.bf16.msra.mxu0 %v4872
  %6960 = vmatprep.subr.bf16.mxu0 0
  %6961 = vmatpush1.bf16.msra.mxu0 %v4873
  %6962 = vmatprep.subr.bf16.mxu0 0
  %6963 = vmatpush1.bf16.msra.mxu0 %v4874
  %6964 = vmatprep.subr.bf16.mxu0 0
  %6965 = vmatpush1.bf16.msra.mxu0 %v4875
  %6966 = vmatprep.subr.bf16.mxu0 0
  %6967 = vmatpush1.bf16.msra.mxu0 %v4876
  %6968 = vmatprep.subr.bf16.mxu0 0
  %6969 = vmatpush1.bf16.msra.mxu0 %v4877
  %6970 = vmatprep.subr.bf16.mxu0 0
  %6971 = vmatpush1.bf16.msra.mxu0 %v4878
  %6972 = vmatprep.subr.bf16.mxu0 0
  %6973 = vmatpush1.bf16.msra.mxu0 %v4879
  %6974 = vmatprep.subr.bf16.mxu0 0
  %6975 = vmatpush1.bf16.msra.mxu0 %v4880
  %6976 = vmatprep.subr.bf16.mxu0 0
  %6977 = vmatpush1.bf16.msra.mxu0 %v4881
  %6978 = vmatprep.mubr.bf16.mxu0 %v1699
  %6979 = vmatmul.mubr.bf16.gmra.mrb[0].mxu0 %v1698
  %v6980 = vpop.f32.mrb[0].mxu0
  %v6981 = vadd.f32 %v6940, %v6980
  %v6982 = vpop.f32.mrb[0].mxu0
  %v6983 = vpop.f32.mrb[0].mxu0
  %v6984 = vadd.f32 %v6943, %v6983
  %v6985 = vpop.f32.mrb[0].mxu0
  %6986 = vdwg.mxu0
  %6987 = vmatprep.subr.bf16.mxu0 0
  %6988 = vmatpush1.bf16.msra.mxu0 %v4882
  %6989 = vmatprep.subr.bf16.mxu0 0
  %6990 = vmatpush1.bf16.msra.mxu0 %v4883
  %6991 = vmatprep.subr.bf16.mxu0 0
  %6992 = vmatpush1.bf16.msra.mxu0 %v4884
  %6993 = vmatprep.subr.bf16.mxu0 0
  %6994 = vmatpush1.bf16.msra.mxu0 %v4885
  %6995 = vmatprep.subr.bf16.mxu0 0
  %6996 = vmatpush1.bf16.msra.mxu0 %v4886
  %6997 = vmatprep.subr.bf16.mxu0 0
  %6998 = vmatpush1.bf16.msra.mxu0 %v4887
  %6999 = vmatprep.subr.bf16.mxu0 0
  %7000 = vmatpush1.bf16.msra.mxu0 %v4888
  %7001 = vmatprep.subr.bf16.mxu0 0
  %7002 = vmatpush1.bf16.msra.mxu0 %v4889
  %7003 = vmatprep.subr.bf16.mxu0 0
  %7004 = vmatpush1.bf16.msra.mxu0 %v4890
  %7005 = vmatprep.subr.bf16.mxu0 0
  %7006 = vmatpush1.bf16.msra.mxu0 %v4891
  %7007 = vmatprep.subr.bf16.mxu0 0
  %7008 = vmatpush1.bf16.msra.mxu0 %v4892
  %7009 = vmatprep.subr.bf16.mxu0 0
  %7010 = vmatpush1.bf16.msra.mxu0 %v4893
  %7011 = vmatprep.subr.bf16.mxu0 0
  %7012 = vmatpush1.bf16.msra.mxu0 %v4894
  %7013 = vmatprep.subr.bf16.mxu0 0
  %7014 = vmatpush1.bf16.msra.mxu0 %v4895
  %7015 = vmatprep.subr.bf16.mxu0 0
  %7016 = vmatpush1.bf16.msra.mxu0 %v4896
  %7017 = vmatprep.subr.bf16.mxu0 0
  %7018 = vmatpush1.bf16.msra.mxu0 %v4897
  %7019 = vmatprep.mubr.bf16.mxu0 %v1701
  %7020 = vmatmul.mubr.bf16.gmra.mrb[0].mxu0 %v1700
  %v7021 = vpop.f32.mrb[0].mxu0
  %v7022 = vadd.f32 %v6981, %v7021
  %v7023 = vpop.f32.mrb[0].mxu0
  %v7024 = vpop.f32.mrb[0].mxu0
  %v7025 = vadd.f32 %v6984, %v7024
  %v7026 = vpop.f32.mrb[0].mxu0
  %7027 = vdwg.mxu0
  %7028 = vmatprep.subr.bf16.mxu0 0
  %7029 = vmatpush1.bf16.msra.mxu0 %v4898
  %7030 = vmatprep.subr.bf16.mxu0 0
  %7031 = vmatpush1.bf16.msra.mxu0 %v4899
  %7032 = vmatprep.subr.bf16.mxu0 0
  %7033 = vmatpush1.bf16.msra.mxu0 %v4900
  %7034 = vmatprep.subr.bf16.mxu0 0
  %7035 = vmatpush1.bf16.msra.mxu0 %v4901
  %7036 = vmatprep.subr.bf16.mxu0 0
  %7037 = vmatpush1.bf16.msra.mxu0 %v4902
  %7038 = vmatprep.subr.bf16.mxu0 0
  %7039 = vmatpush1.bf16.msra.mxu0 %v4903
  %7040 = vmatprep.subr.bf16.mxu0 0
  %7041 = vmatpush1.bf16.msra.mxu0 %v4904
  %7042 = vmatprep.subr.bf16.mxu0 0
  %7043 = vmatpush1.bf16.msra.mxu0 %v4905
  %7044 = vmatprep.subr.bf16.mxu0 0
  %7045 = vmatpush1.bf16.msra.mxu0 %v4906
  %7046 = vmatprep.subr.bf16.mxu0 0
  %7047 = vmatpush1.bf16.msra.mxu0 %v4907
  %7048 = vmatprep.subr.bf16.mxu0 0
  %7049 = vmatpush1.bf16.msra.mxu0 %v4908
  %7050 = vmatprep.subr.bf16.mxu0 0
  %7051 = vmatpush1.bf16.msra.mxu0 %v4909
  %7052 = vmatprep.subr.bf16.mxu0 0
  %7053 = vmatpush1.bf16.msra.mxu0 %v4910
  %7054 = vmatprep.subr.bf16.mxu0 0
  %7055 = vmatpush1.bf16.msra.mxu0 %v4911
  %7056 = vmatprep.subr.bf16.mxu0 0
  %7057 = vmatpush1.bf16.msra.mxu0 %v4912
  %7058 = vmatprep.subr.bf16.mxu0 0
  %7059 = vmatpush1.bf16.msra.mxu0 %v4913
  %7060 = vmatprep.mubr.bf16.mxu0 %v1703
  %7061 = vmatmul.mubr.bf16.gmra.mrb[0].mxu0 %v1702
  %v7062 = vpop.f32.mrb[0].mxu0
  %v7063 = vadd.f32 %v7022, %v7062
  %v7064 = vpop.f32.mrb[0].mxu0
  %v7065 = vpop.f32.mrb[0].mxu0
  %v7066 = vadd.f32 %v7025, %v7065
  %v7067 = vpop.f32.mrb[0].mxu0
  %7068 = vdwg.mxu0
  %7069 = vmatprep.subr.bf16.mxu0 0
  %7070 = vmatpush1.bf16.msra.mxu0 %v4914
  %7071 = vmatprep.subr.bf16.mxu0 0
  %7072 = vmatpush1.bf16.msra.mxu0 %v4915
  %7073 = vmatprep.subr.bf16.mxu0 0
  %7074 = vmatpush1.bf16.msra.mxu0 %v4916
  %7075 = vmatprep.subr.bf16.mxu0 0
  %7076 = vmatpush1.bf16.msra.mxu0 %v4917
  %7077 = vmatprep.subr.bf16.mxu0 0
  %7078 = vmatpush1.bf16.msra.mxu0 %v4918
  %7079 = vmatprep.subr.bf16.mxu0 0
  %7080 = vmatpush1.bf16.msra.mxu0 %v4919
  %7081 = vmatprep.subr.bf16.mxu0 0
  %7082 = vmatpush1.bf16.msra.mxu0 %v4920
  %7083 = vmatprep.subr.bf16.mxu0 0
  %7084 = vmatpush1.bf16.msra.mxu0 %v4921
  %7085 = vmatprep.subr.bf16.mxu0 0
  %7086 = vmatpush1.bf16.msra.mxu0 %v4922
  %7087 = vmatprep.subr.bf16.mxu0 0
  %7088 = vmatpush1.bf16.msra.mxu0 %v4923
  %7089 = vmatprep.subr.bf16.mxu0 0
  %7090 = vmatpush1.bf16.msra.mxu0 %v4924
  %7091 = vmatprep.subr.bf16.mxu0 0
  %7092 = vmatpush1.bf16.msra.mxu0 %v4925
  %7093 = vmatprep.subr.bf16.mxu0 0
  %7094 = vmatpush1.bf16.msra.mxu0 %v4926
  %7095 = vmatprep.subr.bf16.mxu0 0
  %7096 = vmatpush1.bf16.msra.mxu0 %v4927
  %7097 = vmatprep.subr.bf16.mxu0 0
  %7098 = vmatpush1.bf16.msra.mxu0 %v4928
  %7099 = vmatprep.subr.bf16.mxu0 0
  %7100 = vmatpush1.bf16.msra.mxu0 %v4929
  %7101 = vmatprep.mubr.bf16.mxu0 %v1705
  %7102 = vmatmul.mubr.bf16.gmra.mrb[0].mxu0 %v1704
  %v7103 = vpop.f32.mrb[0].mxu0
  %v7104 = vadd.f32 %v7063, %v7103
  %v7105 = vpop.f32.mrb[0].mxu0
  %v7106 = vpop.f32.mrb[0].mxu0
  %v7107 = vadd.f32 %v7066, %v7106
  %v7108 = vpop.f32.mrb[0].mxu0
  %7109 = vdwg.mxu0
  %7110 = vmatprep.subr.bf16.mxu0 0
  %7111 = vmatpush1.bf16.msra.mxu0 %v4930
  %7112 = vmatprep.subr.bf16.mxu0 0
  %7113 = vmatpush1.bf16.msra.mxu0 %v4931
  %7114 = vmatprep.subr.bf16.mxu0 0
  %7115 = vmatpush1.bf16.msra.mxu0 %v4932
  %7116 = vmatprep.subr.bf16.mxu0 0
  %7117 = vmatpush1.bf16.msra.mxu0 %v4933
  %7118 = vmatprep.subr.bf16.mxu0 0
  %7119 = vmatpush1.bf16.msra.mxu0 %v4934
  %7120 = vmatprep.subr.bf16.mxu0 0
  %7121 = vmatpush1.bf16.msra.mxu0 %v4935
  %7122 = vmatprep.subr.bf16.mxu0 0
  %7123 = vmatpush1.bf16.msra.mxu0 %v4936
  %7124 = vmatprep.subr.bf16.mxu0 0
  %7125 = vmatpush1.bf16.msra.mxu0 %v4937
  %7126 = vmatprep.subr.bf16.mxu0 0
  %7127 = vmatpush1.bf16.msra.mxu0 %v4938
  %7128 = vmatprep.subr.bf16.mxu0 0
  %7129 = vmatpush1.bf16.msra.mxu0 %v4939
  %7130 = vmatprep.subr.bf16.mxu0 0
  %7131 = vmatpush1.bf16.msra.mxu0 %v4940
  %7132 = vmatprep.subr.bf16.mxu0 0
  %7133 = vmatpush1.bf16.msra.mxu0 %v4941
  %7134 = vmatprep.subr.bf16.mxu0 0
  %7135 = vmatpush1.bf16.msra.mxu0 %v4942
  %7136 = vmatprep.subr.bf16.mxu0 0
  %7137 = vmatpush1.bf16.msra.mxu0 %v4943
  %7138 = vmatprep.subr.bf16.mxu0 0
  %7139 = vmatpush1.bf16.msra.mxu0 %v4944
  %7140 = vmatprep.subr.bf16.mxu0 0
  %7141 = vmatpush1.bf16.msra.mxu0 %v4945
  %7142 = vmatprep.mubr.bf16.mxu0 %v1707
  %7143 = vmatmul.mubr.bf16.gmra.mrb[0].mxu0 %v1706
  %v7144 = vpop.f32.mrb[0].mxu0
  %v7145 = vadd.f32 %v7104, %v7144
  %v7146 = vpop.f32.mrb[0].mxu0
  %v7147 = vpop.f32.mrb[0].mxu0
  %v7148 = vadd.f32 %v7107, %v7147
  %v7149 = vpop.f32.mrb[0].mxu0
  %7150 = vdwg.mxu0
  %7151 = vmatprep.subr.bf16.mxu0 0
  %7152 = vmatpush1.bf16.msra.mxu0 %v4946
  %7153 = vmatprep.subr.bf16.mxu0 0
  %7154 = vmatpush1.bf16.msra.mxu0 %v4947
  %7155 = vmatprep.subr.bf16.mxu0 0
  %7156 = vmatpush1.bf16.msra.mxu0 %v4948
  %7157 = vmatprep.subr.bf16.mxu0 0
  %7158 = vmatpush1.bf16.msra.mxu0 %v4949
  %7159 = vmatprep.subr.bf16.mxu0 0
  %7160 = vmatpush1.bf16.msra.mxu0 %v4950
  %7161 = vmatprep.subr.bf16.mxu0 0
  %7162 = vmatpush1.bf16.msra.mxu0 %v4951
  %7163 = vmatprep.subr.bf16.mxu0 0
  %7164 = vmatpush1.bf16.msra.mxu0 %v4952
  %7165 = vmatprep.subr.bf16.mxu0 0
  %7166 = vmatpush1.bf16.msra.mxu0 %v4953
  %7167 = vmatprep.subr.bf16.mxu0 0
  %7168 = vmatpush1.bf16.msra.mxu0 %v4954
  %7169 = vmatprep.subr.bf16.mxu0 0
  %7170 = vmatpush1.bf16.msra.mxu0 %v4955
  %7171 = vmatprep.subr.bf16.mxu0 0
  %7172 = vmatpush1.bf16.msra.mxu0 %v4956
  %7173 = vmatprep.subr.bf16.mxu0 0
  %7174 = vmatpush1.bf16.msra.mxu0 %v4957
  %7175 = vmatprep.subr.bf16.mxu0 0
  %7176 = vmatpush1.bf16.msra.mxu0 %v4958
  %7177 = vmatprep.subr.bf16.mxu0 0
  %7178 = vmatpush1.bf16.msra.mxu0 %v4959
  %7179 = vmatprep.subr.bf16.mxu0 0
  %7180 = vmatpush1.bf16.msra.mxu0 %v4960
  %7181 = vmatprep.subr.bf16.mxu0 0
  %7182 = vmatpush1.bf16.msra.mxu0 %v4961
  %7183 = vmatprep.mubr.bf16.mxu0 %v1709
  %7184 = vmatmul.mubr.bf16.gmra.mrb[0].mxu0 %v1708
  %v7185 = vpop.f32.mrb[0].mxu0
  %v7186 = vadd.f32 %v7145, %v7185
  %v7187 = vpop.f32.mrb[0].mxu0
  %v7188 = vpop.f32.mrb[0].mxu0
  %v7189 = vadd.f32 %v7148, %v7188
  %v7190 = vpop.f32.mrb[0].mxu0
  %7191 = vdwg.mxu0
  %7192 = vmatprep.subr.bf16.mxu0 0
  %7193 = vmatpush1.bf16.msra.mxu0 %v4962
  %7194 = vmatprep.subr.bf16.mxu0 0
  %7195 = vmatpush1.bf16.msra.mxu0 %v4963
  %7196 = vmatprep.subr.bf16.mxu0 0
  %7197 = vmatpush1.bf16.msra.mxu0 %v4964
  %7198 = vmatprep.subr.bf16.mxu0 0
  %7199 = vmatpush1.bf16.msra.mxu0 %v4965
  %7200 = vmatprep.subr.bf16.mxu0 0
  %7201 = vmatpush1.bf16.msra.mxu0 %v4966
  %7202 = vmatprep.subr.bf16.mxu0 0
  %7203 = vmatpush1.bf16.msra.mxu0 %v4967
  %7204 = vmatprep.subr.bf16.mxu0 0
  %7205 = vmatpush1.bf16.msra.mxu0 %v4968
  %7206 = vmatprep.subr.bf16.mxu0 0
  %7207 = vmatpush1.bf16.msra.mxu0 %v4969
  %7208 = vmatprep.subr.bf16.mxu0 0
  %7209 = vmatpush1.bf16.msra.mxu0 %v4970
  %7210 = vmatprep.subr.bf16.mxu0 0
  %7211 = vmatpush1.bf16.msra.mxu0 %v4971
  %7212 = vmatprep.subr.bf16.mxu0 0
  %7213 = vmatpush1.bf16.msra.mxu0 %v4972
  %7214 = vmatprep.subr.bf16.mxu0 0
  %7215 = vmatpush1.bf16.msra.mxu0 %v4973
  %7216 = vmatprep.subr.bf16.mxu0 0
  %7217 = vmatpush1.bf16.msra.mxu0 %v4974
  %7218 = vmatprep.subr.bf16.mxu0 0
  %7219 = vmatpush1.bf16.msra.mxu0 %v4975
  %7220 = vmatprep.subr.bf16.mxu0 0
  %7221 = vmatpush1.bf16.msra.mxu0 %v4976
  %7222 = vmatprep.subr.bf16.mxu0 0
  %7223 = vmatpush1.bf16.msra.mxu0 %v4977
  %7224 = vmatprep.mubr.bf16.mxu0 %v1711
  %7225 = vmatmul.mubr.bf16.gmra.mrb[0].mxu0 %v1710
  %v7226 = vpop.f32.mrb[0].mxu0
  %v7227 = vadd.f32 %v7186, %v7226
  %v7228 = vpop.f32.mrb[0].mxu0
  %v7229 = vpop.f32.mrb[0].mxu0
  %v7230 = vadd.f32 %v7189, %v7229
  %v7231 = vpop.f32.mrb[0].mxu0
  %7232 = vdwg.mxu0
  %7233 = vmatprep.subr.bf16.mxu0 0
  %7234 = vmatpush1.bf16.msra.mxu0 %v4978
  %7235 = vmatprep.subr.bf16.mxu0 0
  %7236 = vmatpush1.bf16.msra.mxu0 %v4979
  %7237 = vmatprep.subr.bf16.mxu0 0
  %7238 = vmatpush1.bf16.msra.mxu0 %v4980
  %7239 = vmatprep.subr.bf16.mxu0 0
  %7240 = vmatpush1.bf16.msra.mxu0 %v4981
  %7241 = vmatprep.subr.bf16.mxu0 0
  %7242 = vmatpush1.bf16.msra.mxu0 %v4982
  %7243 = vmatprep.subr.bf16.mxu0 0
  %7244 = vmatpush1.bf16.msra.mxu0 %v4983
  %7245 = vmatprep.subr.bf16.mxu0 0
  %7246 = vmatpush1.bf16.msra.mxu0 %v4984
  %7247 = vmatprep.subr.bf16.mxu0 0
  %7248 = vmatpush1.bf16.msra.mxu0 %v4985
  %7249 = vmatprep.subr.bf16.mxu0 0
  %7250 = vmatpush1.bf16.msra.mxu0 %v4986
  %7251 = vmatprep.subr.bf16.mxu0 0
  %7252 = vmatpush1.bf16.msra.mxu0 %v4987
  %7253 = vmatprep.subr.bf16.mxu0 0
  %7254 = vmatpush1.bf16.msra.mxu0 %v4988
  %7255 = vmatprep.subr.bf16.mxu0 0
  %7256 = vmatpush1.bf16.msra.mxu0 %v4989
  %7257 = vmatprep.subr.bf16.mxu0 0
  %7258 = vmatpush1.bf16.msra.mxu0 %v4990
  %7259 = vmatprep.subr.bf16.mxu0 0
  %7260 = vmatpush1.bf16.msra.mxu0 %v4991
  %7261 = vmatprep.subr.bf16.mxu0 0
  %7262 = vmatpush1.bf16.msra.mxu0 %v4992
  %7263 = vmatprep.subr.bf16.mxu0 0
  %7264 = vmatpush1.bf16.msra.mxu0 %v4993
  %7265 = vmatprep.mubr.bf16.mxu0 %v1713
  %7266 = vmatmul.mubr.bf16.gmra.mrb[0].mxu0 %v1712
  %v7267 = vpop.f32.mrb[0].mxu0
  %v7268 = vadd.f32 %v7227, %v7267
  %v7269 = vpop.f32.mrb[0].mxu0
  %v7270 = vpop.f32.mrb[0].mxu0
  %v7271 = vadd.f32 %v7230, %v7270
  %v7272 = vpop.f32.mrb[0].mxu0
  %7273 = vdwg.mxu0
  %v7274 = vmax.f32 %v7268, 0.0
  %v7275 = vmax.f32 %v7271, 0.0
  %v7276 = vpack.c.bf16 %v7275, %v7274
  %v7277 = vld [vmem:[%s3] sm:$0xf]
  %v7278 = vld [vmem:[%s3 + $0x4] sm:$0xf]
  %v7279 = vld [vmem:[%s3 + $0x8] sm:$0xf]
  %v7280 = vld [vmem:[%s3 + $0xc] sm:$0xf]
  %v7281 = vld [vmem:[%s3 + $0x10] sm:$0xf]
  %v7282 = vld [vmem:[%s3 + $0x14] sm:$0xf]
  %v7283 = vld [vmem:[%s3 + $0x18] sm:$0xf]
  %v7284 = vld [vmem:[%s3 + $0x1c] sm:$0xf]
  %v7285 = vld [vmem:[%s3 + $0x20] sm:$0xf]
  %v7286 = vld [vmem:[%s3 + $0x24] sm:$0xf]
  %v7287 = vld [vmem:[%s3 + $0x28] sm:$0xf]
  %v7288 = vld [vmem:[%s3 + $0x2c] sm:$0xf]
  %v7289 = vld [vmem:[%s3 + $0x30] sm:$0xf]
  %v7290 = vld [vmem:[%s3 + $0x34] sm:$0xf]
  %v7291 = vld [vmem:[%s3 + $0x38] sm:$0xf]
  %v7292 = vld [vmem:[%s3 + $0x3c] sm:$0xf]
  %v7293 = vld [vmem:[%s4] sm:$0x1]
  %v7295 = vlaneseq
  %v7296 = vshrl.u32 %v7295, 7
  %v7297 = vsub.s32 0, %v7296
  %v7298 = vrot.slane %v7293, %v7297
  %v7316 = vunpack.c.l.b16 %v7277
  %v7317 = vunpack.c.l.b16 %v7278
  %v7318 = vunpack.c.l.b16 %v7279
  %v7319 = vunpack.c.l.b16 %v7280
  %v7320 = vunpack.c.l.b16 %v7281
  %v7321 = vunpack.c.l.b16 %v7282
  %v7322 = vunpack.c.l.b16 %v7283
  %v7323 = vunpack.c.l.b16 %v7284
  %v7324 = vunpack.c.l.b16 %v7285
  %v7325 = vunpack.c.l.b16 %v7286
  %v7326 = vunpack.c.l.b16 %v7287
  %v7327 = vunpack.c.l.b16 %v7288
  %v7328 = vunpack.c.l.b16 %v7289
  %v7329 = vunpack.c.l.b16 %v7290
  %v7330 = vunpack.c.l.b16 %v7291
  %v7331 = vunpack.c.l.b16 %v7292
  %v7332 = vpack.c.b16 %v7317, %v7316
  %v7333 = vpack.c.b16 %v7319, %v7318
  %v7334 = vpack.c.b16 %v7321, %v7320
  %v7335 = vpack.c.b16 %v7323, %v7322
  %v7336 = vpack.c.b16 %v7325, %v7324
  %v7337 = vpack.c.b16 %v7327, %v7326
  %v7338 = vpack.c.b16 %v7329, %v7328
  %v7339 = vpack.c.b16 %v7331, %v7330
  %7348 = vmatprep.subr.bf16.mxu0 0
  %7349 = vmatpush1.bf16.msra.mxu0 %v7332
  %7350 = vmatprep.subr.bf16.mxu0 0
  %7351 = vmatpush1.bf16.msra.mxu0 %v7333
  %7352 = vmatprep.subr.bf16.mxu0 0
  %7353 = vmatpush1.bf16.msra.mxu0 %v7334
  %7354 = vmatprep.subr.bf16.mxu0 0
  %7355 = vmatpush1.bf16.msra.mxu0 %v7335
  %7356 = vmatprep.subr.bf16.mxu0 0
  %7357 = vmatpush1.bf16.msra.mxu0 %v7336
  %7358 = vmatprep.subr.bf16.mxu0 0
  %7359 = vmatpush1.bf16.msra.mxu0 %v7337
  %7360 = vmatprep.subr.bf16.mxu0 0
  %7361 = vmatpush1.bf16.msra.mxu0 %v7338
  %7362 = vmatprep.subr.bf16.mxu0 0
  %7363 = vmatpush1.bf16.msra.mxu0 %v7339
  %7364 = vmatprep.subr.bf16.mxu0 0
  %7365 = vmatpush1.bf16.msra.mxu0 0
  %7366 = vmatprep.subr.bf16.mxu0 0
  %7367 = vmatpush1.bf16.msra.mxu0 0
  %7368 = vmatprep.subr.bf16.mxu0 0
  %7369 = vmatpush1.bf16.msra.mxu0 0
  %7370 = vmatprep.subr.bf16.mxu0 0
  %7371 = vmatpush1.bf16.msra.mxu0 0
  %7372 = vmatprep.subr.bf16.mxu0 0
  %7373 = vmatpush1.bf16.msra.mxu0 0
  %7374 = vmatprep.subr.bf16.mxu0 0
  %7375 = vmatpush1.bf16.msra.mxu0 0
  %7376 = vmatprep.subr.bf16.mxu0 0
  %7377 = vmatpush1.bf16.msra.mxu0 0
  %7378 = vmatprep.subr.bf16.mxu0 0
  %7379 = vmatpush1.bf16.msra.mxu0 0
  %7380 = vmatprep.mubr.bf16.mxu0 0
  %7381 = vmatmul.mubr.bf16.gmra.mrb[0].mxu0 %v7276
  %v7382 = vpop.f32.mrb[0].mxu0
  %v7383 = vadd.f32 %v7298, %v7382
  %v7384 = vpop.f32.mrb[0].mxu0
  %v7385 = vpop.f32.mrb[0].mxu0
  %v7386 = vadd.f32 %v7298, %v7385
  %v7387 = vpop.f32.mrb[0].mxu0
  %7388 = vdwg.mxu0
  %v7389 = vmax.f32 %v7383, 0.0
  %v7390 = vmax.f32 %v7386, 0.0
  %v7391 = vpack.c.bf16 %v7390, %v7389
  %v7392 = vld [vmem:[%s5] sm:$0xf]
  %v7393 = vld [vmem:[%s5 + $0x4] sm:$0xf]
  %v7394 = vld [vmem:[%s5 + $0x8] sm:$0xf]
  %v7395 = vld [vmem:[%s5 + $0xc] sm:$0xf]
  %v7396 = vld [vmem:[%s5 + $0x10] sm:$0xf]
  %v7397 = vld [vmem:[%s5 + $0x14] sm:$0xf]
  %v7398 = vld [vmem:[%s5 + $0x18] sm:$0xf]
  %v7399 = vld [vmem:[%s5 + $0x1c] sm:$0xf]
  %v7400 = vld [vmem:[%s5 + $0x20] sm:$0xf]
  %v7401 = vld [vmem:[%s5 + $0x24] sm:$0xf]
  %v7402 = vld [vmem:[%s5 + $0x28] sm:$0xf]
  %v7403 = vld [vmem:[%s5 + $0x2c] sm:$0xf]
  %v7404 = vld [vmem:[%s5 + $0x30] sm:$0xf]
  %v7405 = vld [vmem:[%s5 + $0x34] sm:$0xf]
  %v7406 = vld [vmem:[%s5 + $0x38] sm:$0xf]
  %v7407 = vld [vmem:[%s5 + $0x3c] sm:$0xf]
  %v7408 = vld [vmem:[%s6] sm:$0x1]
  %v7410 = vlaneseq
  %v7411 = vshrl.u32 %v7410, 7
  %v7412 = vsub.s32 0, %v7411
  %v7413 = vrot.slane %v7408, %v7412
  %v7431 = vunpack.c.l.b16 %v7392
  %v7432 = vunpack.c.l.b16 %v7393
  %v7433 = vunpack.c.l.b16 %v7394
  %v7434 = vunpack.c.l.b16 %v7395
  %v7435 = vunpack.c.l.b16 %v7396
  %v7436 = vunpack.c.l.b16 %v7397
  %v7437 = vunpack.c.l.b16 %v7398
  %v7438 = vunpack.c.l.b16 %v7399
  %v7439 = vunpack.c.l.b16 %v7400
  %v7440 = vunpack.c.l.b16 %v7401
  %v7441 = vunpack.c.l.b16 %v7402
  %v7442 = vunpack.c.l.b16 %v7403
  %v7443 = vunpack.c.l.b16 %v7404
  %v7444 = vunpack.c.l.b16 %v7405
  %v7445 = vunpack.c.l.b16 %v7406
  %v7446 = vunpack.c.l.b16 %v7407
  %v7447 = vpack.c.b16 %v7432, %v7431
  %v7448 = vpack.c.b16 %v7434, %v7433
  %v7449 = vpack.c.b16 %v7436, %v7435
  %v7450 = vpack.c.b16 %v7438, %v7437
  %v7451 = vpack.c.b16 %v7440, %v7439
  %v7452 = vpack.c.b16 %v7442, %v7441
  %v7453 = vpack.c.b16 %v7444, %v7443
  %v7454 = vpack.c.b16 %v7446, %v7445
  %7463 = vmatprep.subr.bf16.mxu0 0
  %7464 = vmatpush1.bf16.msra.mxu0 %v7447
  %7465 = vmatprep.subr.bf16.mxu0 0
  %7466 = vmatpush1.bf16.msra.mxu0 %v7448
  %7467 = vmatprep.subr.bf16.mxu0 0
  %7468 = vmatpush1.bf16.msra.mxu0 %v7449
  %7469 = vmatprep.subr.bf16.mxu0 0
  %7470 = vmatpush1.bf16.msra.mxu0 %v7450
  %7471 = vmatprep.subr.bf16.mxu0 0
  %7472 = vmatpush1.bf16.msra.mxu0 %v7451
  %7473 = vmatprep.subr.bf16.mxu0 0
  %7474 = vmatpush1.bf16.msra.mxu0 %v7452
  %7475 = vmatprep.subr.bf16.mxu0 0
  %7476 = vmatpush1.bf16.msra.mxu0 %v7453
  %7477 = vmatprep.subr.bf16.mxu0 0
  %7478 = vmatpush1.bf16.msra.mxu0 %v7454
  %7479 = vmatprep.subr.bf16.mxu0 0
  %7480 = vmatpush1.bf16.msra.mxu0 0
  %7481 = vmatprep.subr.bf16.mxu0 0
  %7482 = vmatpush1.bf16.msra.mxu0 0
  %7483 = vmatprep.subr.bf16.mxu0 0
  %7484 = vmatpush1.bf16.msra.mxu0 0
  %7485 = vmatprep.subr.bf16.mxu0 0
  %7486 = vmatpush1.bf16.msra.mxu0 0
  %7487 = vmatprep.subr.bf16.mxu0 0
  %7488 = vmatpush1.bf16.msra.mxu0 0
  %7489 = vmatprep.subr.bf16.mxu0 0
  %7490 = vmatpush1.bf16.msra.mxu0 0
  %7491 = vmatprep.subr.bf16.mxu0 0
  %7492 = vmatpush1.bf16.msra.mxu0 0
  %7493 = vmatprep.subr.bf16.mxu0 0
  %7494 = vmatpush1.bf16.msra.mxu0 0
  %7495 = vmatprep.mubr.bf16.mxu0 0
  %7496 = vmatmul.mubr.bf16.gmra.mrb[0].mxu0 %v7391
  %v7497 = vpop.f32.mrb[0].mxu0
  %v7498 = vadd.f32 %v7413, %v7497
  %v7499 = vpop.f32.mrb[0].mxu0
  %v7500 = vpop.f32.mrb[0].mxu0
  %v7501 = vadd.f32 %v7413, %v7500
  %v7502 = vpop.f32.mrb[0].mxu0
  %7503 = vdwg.mxu0
  %7504 = vst [vmem:[%s7] sm:$0xff] %v7498
  %7505 = vst [vmem:[%s7 + $0x8] sm:$0xff] %v7501
  // Predicated region
  $region30: #{convnet_forward.3} parent=0 // pred_check
    _
  $region31: #{convnet_forward.3} parent=0 // pred_check_branch
    %7507 = sbr.rel (0) target = $region33
  $region32: #{convnet_forward.3} parent=0 // pred_region
    _
  $region33: #{convnet_forward.3} parent=0 // pred_fallthru
    _
  // Predicated region
  $region34: #{convnet_forward.3} parent=0 // pred_check
    _
  $region35: #{convnet_forward.3} parent=0 // pred_check_branch
    %7509 = sbr.rel (0) target = $region37
  $region36: #{convnet_forward.3} parent=0 // pred_region
    _
  $region37: #{convnet_forward.3} parent=0 // pred_fallthru
    _

</llo_original>
